<compile_context>
chip_gen: v7x
topology: tpu7x:2x2x1
jax: 0.10.0
libtpu: 0.0.40
codegen_flags: <defaults>
</compile_context>

<pallas_src>
import jax
import jax.numpy as jnp
from jax import lax
from jax.experimental import pallas as pl
from jax.experimental.pallas import tpu as pltpu


# ----------------------------- Pallas kernel ------------------------------- #

def fused_forward_kernel(patches_ref, wcp_ref, bc_ref, w1_ref, b1_ref,
                         w2_ref, b2_ref, out_ref):
    # patches_ref: [4, BB*100, 144] bf16  leading 4 = dh offset group, rows
    #                                     ordered (pooled_pos, batch_in_block),
    #                                     trailing 144 = (dw, ki, kj) taps.
    # wcp_ref:     [144, 256]      bf16   block-diag x4 of the [36,64] conv w
    # bc_ref:      [1, 64]         f32    conv bias
    # w1_ref:      [100, 64, 128]  bf16   fc1 weight (pos, channel, hidden)
    # b1_ref:      [1, 128]        f32
    # w2_ref:      [128, 10]       f32
    # b2_ref:      [1, 10]         f32
    # out_ref:     [BB, 10]        f32    log_softmax output
    n_grp = patches_ref.shape[0]            # 4 packed offset groups (dh)
    n_pos = w1_ref.shape[0]                  # 100 pooled positions
    n_ch = bc_ref.shape[1]                   # 64 conv channels
    bb = out_ref.shape[0]                    # batch elements per grid step

    wcp = wcp_ref[...]
    # Each group g is one (BB*100,144)x(144,256) MXU matmul whose four 64-lane
    # column groups hold the conv outputs of four pooling-window offsets;
    # pooling is a running elementwise max over lane groups and over g
    # (conv bias hoisted out of the max).
    pool = None
    for g in range(n_grp):
        y = jnp.dot(patches_ref[g], wcp,
                    preferred_element_type=jnp.float32)         # [BB*100, 256]
        h = jnp.maximum(y[:, :2 * n_ch], y[:, 2 * n_ch:])        # [BB*100, 128]
        m = jnp.maximum(h[:, :n_ch], h[:, n_ch:])                # [BB*100, 64]
        pool = m if g == 0 else jnp.maximum(pool, m)
    pooled = jnp.maximum(pool + bc_ref[...], 0.0)                # [BB*100, 64] f32

    # fc1 as a position-batched contraction: h1 = sum_p pooled[p] @ w1[p].
    pooled3 = pooled.reshape(n_pos, bb, n_ch).astype(jnp.bfloat16)
    t = lax.dot_general(pooled3, w1_ref[...],
                        dimension_numbers=(((2,), (1,)), ((0,), (0,))),
                        preferred_element_type=jnp.float32)      # [100, BB, 128]
    h1 = jnp.maximum(jnp.sum(t, axis=0) + b1_ref[...], 0.0)      # [BB, 128] f32

    logits = jnp.dot(h1, w2_ref[...],
                     preferred_element_type=jnp.float32) + b2_ref[...]
    mx = jnp.max(logits, axis=-1, keepdims=True)
    s = logits - mx
    out_ref[...] = s - jnp.log(jnp.sum(jnp.exp(s), axis=-1, keepdims=True))


# ------------------------------ JAX glue ----------------------------------- #

def _vmem_cap_bytes():
    # v5e/v6e: 128 MiB physical VMEM per core; v7x: 64 MiB.  Only used to pick
    # the batch block / VMEM limit; falls back to a v7x-sized assumption.
    try:
        return int(pltpu.get_tpu_info().vmem_capacity_bytes)
    except Exception:
        return 64 * 1024 * 1024


_MAX_BB = 64 if _vmem_cap_bytes() >= 100 * 1024 * 1024 else 32
_VMEM_LIMIT_BYTES = (56 if _MAX_BB == 64 else 40) * 1024 * 1024


def _pick_block(batch):
    """Largest allowed batch block that still gives >= 2 grid steps (so the
    'parallel' axis shards across v7x's 2 TensorCores); 8 for tiny batches to
    limit padding waste."""
    for bb in (64, 32, 16, 8):
        if bb <= _MAX_BB and batch >= 2 * bb:
            return bb
    return 8


def _im2col_patches_packed(x, bb):
    """x: [Bp,1,45,45] (Bp % bb == 0) -> [4, Bp*100, 144].

    Leading 4 = dh (vertical pooling-window offset); middle rows are ordered
    (batch_block, pooled_pos = ph*10+pw, batch_in_block) so each batch block is
    100*bb contiguous rows; trailing 144 = (dw, ki, kj): 4 horizontal offsets x
    36 conv taps, matching the 4-way block-diagonal conv weight packing.
    """
    Bp = x.shape[0]
    nb = Bp // bb
    xs = x[:, 0]                                               # [Bp, 45, 45]
    idx = (4 * jnp.arange(10)[:, None, None]
           + jnp.arange(4)[None, :, None]
           + jnp.arange(6)[None, None, :])                     # [10, 4, 6]
    p = xs[:, idx[:, :, :, None, None, None], idx[None, None, None, :, :, :]]
    # p: [Bp, 10(ph), 4(dh), 6(ki), 10(pw), 4(dw), 6(kj)]
    p = p.reshape(nb, bb, 10, 4, 6, 10, 4, 6)
    # axes (nb, bin, ph, dh, ki, pw, dw, kj) -> (dh, nb, ph, pw, bin, dw, ki, kj)
    p = p.transpose(3, 0, 2, 5, 1, 6, 4, 7)
    return p.reshape(4, nb * 100 * bb, 4 * 36)


@jax.jit
def model_forward(x, conv_w, conv_b, fc1_w, fc1_b, fc2_w, fc2_b):
    B = x.shape[0]
    BB = _pick_block(B)
    Bp = ((B + BB - 1) // BB) * BB
    xp = x.astype(jnp.float32)
    if Bp != B:
        xp = jnp.pad(xp, ((0, Bp - B), (0, 0), (0, 0), (0, 0)))
    nb = Bp // BB

    patches = _im2col_patches_packed(xp, BB).astype(jnp.bfloat16)  # [4, Bp*100, 144]
    wc = conv_w.reshape(64, 36).T.astype(jnp.float32)              # [36, 64]
    # 4-way block-diagonal packing of the conv weight: [144, 256].
    wcp = jnp.kron(jnp.eye(4, dtype=jnp.float32), wc).astype(jnp.bfloat16)
    bc = conv_b.reshape(1, 64).astype(jnp.float32)
    # fc1_w is [128, 6400] over a PyTorch (c, ph, pw) flatten; reorganize to
    # [pos, channel, hidden] to match the kernel's (pos, batch, channel) acts.
    w1 = fc1_w.reshape(128, 64, 100).transpose(2, 1, 0).astype(jnp.bfloat16)
    b1 = fc1_b.reshape(1, 128).astype(jnp.float32)
    w2 = fc2_w.T.astype(jnp.float32)                               # [128, 10]
    b2 = fc2_b.reshape(1, 10).astype(jnp.float32)

    out = pl.pallas_call(
        fused_forward_kernel,
        out_shape=jax.ShapeDtypeStruct((Bp, 10), jnp.float32),
        grid=(nb,),
        in_specs=[
            pl.BlockSpec((4, 100 * BB, 144), lambda i: (0, i, 0)),   # patches
            pl.BlockSpec((144, 256), lambda i: (0, 0)),              # packed conv w
            pl.BlockSpec((1, 64), lambda i: (0, 0)),                 # conv b
            pl.BlockSpec((100, 64, 128), lambda i: (0, 0, 0)),       # fc1 w
            pl.BlockSpec((1, 128), lambda i: (0, 0)),                # fc1 b
            pl.BlockSpec((128, 10), lambda i: (0, 0)),               # fc2 w
            pl.BlockSpec((1, 10), lambda i: (0, 0)),                 # fc2 b
        ],
        out_specs=pl.BlockSpec((BB, 10), lambda i: (i, 0)),
        compiler_params=pltpu.CompilerParams(
            dimension_semantics=("parallel",),
            vmem_limit_bytes=_VMEM_LIMIT_BYTES,
        ),
    )(patches, wcp, bc, w1, b1, w2, b2)
    return out[:B]


# Pure-JAX reference with PyTorch semantics (NCHW conv, max_pool2d, x @ W.T + b).
def reference_forward(x, conv_w, conv_b, fc1_w, fc1_b, fc2_w, fc2_b):
    conv = lax.conv_general_dilated(
        x, conv_w, window_strides=(1, 1), padding="VALID",
        dimension_numbers=("NCHW", "OIHW", "NCHW"))
    conv = conv + conv_b[None, :, None, None]
    pooled = lax.reduce_window(conv, -jnp.inf, lax.max,
                               (1, 1, 4, 4), (1, 1, 4, 4), "VALID")
    act = jnp.maximum(pooled, 0.0)
    flat = act.reshape(act.shape[0], -1)
    h1 = jnp.maximum(flat @ fc1_w.T + fc1_b, 0.0)
    logits = h1 @ fc2_w.T + fc2_b
    return jax.nn.log_softmax(logits, axis=1)


def init_params(key):
    ks = jax.random.split(key, 6)
    conv_w = jax.random.normal(ks[0], (64, 1, 6, 6), jnp.float32) * (1.0 / 6.0)
    conv_b = jax.random.normal(ks[1], (64,), jnp.float32) * 0.1
    fc1_w = jax.random.normal(ks[2], (128, 6400), jnp.float32) * 0.0125
    fc1_b = jax.random.normal(ks[3], (128,), jnp.float32) * 0.1
    fc2_w = jax.random.normal(ks[4], (10, 128), jnp.float32) * 0.088
    fc2_b = jax.random.normal(ks[5], (10,), jnp.float32) * 0.1
    return conv_w, conv_b, fc1_w, fc1_b, fc2_w, fc2_b


if __name__ == "__main__":
    key = jax.random.PRNGKey(0)
    k_x, k_p = jax.random.split(key)
    # Input shape implied by fc1's 6400 inputs: 1x45x45 -> conv6 -> 40x40
    # -> pool4 -> 10x10 -> 64*10*10 = 6400.
    x = jax.random.normal(k_x, (2, 1, 45, 45), jnp.float32)
    params = init_params(k_p)

    out = model_forward(x, *params)
    out = jax.block_until_ready(out)

    ref = reference_forward(x, *params)
    err = float(jnp.max(jnp.abs(out - ref)))
    assert out.shape == (2, 10), out.shape
    assert jnp.all(jnp.isfinite(out)), "non-finite output"
    assert err < 5e-2, f"mismatch vs reference: max abs err = {err}"

    print("KERNEL_OK")
</pallas_src>

<mosaic_0001>
module attributes {stable_mosaic.version = 11 : i64} {
  func.func @fused_forward_kernel(%arg0: i32, %arg1: memref<4x800x144xbf16, #tpu.memory_space<vmem>>, %arg2: memref<144x256xbf16, #tpu.memory_space<vmem>>, %arg3: memref<1x64xf32, #tpu.memory_space<vmem>>, %arg4: memref<100x64x128xbf16, #tpu.memory_space<vmem>>, %arg5: memref<1x128xf32, #tpu.memory_space<vmem>>, %arg6: memref<128x10xf32, #tpu.memory_space<vmem>>, %arg7: memref<1x10xf32, #tpu.memory_space<vmem>>, %arg8: memref<8x10xf32, #tpu.memory_space<vmem>>) attributes {dimension_semantics = [#tpu.dimension_semantics<parallel>], iteration_bounds = array<i64: 1>, scalar_prefetch = 0 : i64, scratch_operands = 0 : i64, tpu.core_type = #tpu.core_type<tc>, window_params = [{transform_indices = @transform_0, window_bounds = array<i64: 4, 800, 144>}, {pipeline_mode = #tpu.pipeline_mode<synchronous>, transform_indices = @transform_1, window_bounds = array<i64: 144, 256>}, {pipeline_mode = #tpu.pipeline_mode<synchronous>, transform_indices = @transform_2, window_bounds = array<i64: 1, 64>}, {pipeline_mode = #tpu.pipeline_mode<synchronous>, transform_indices = @transform_3, window_bounds = array<i64: 100, 64, 128>}, {pipeline_mode = #tpu.pipeline_mode<synchronous>, transform_indices = @transform_4, window_bounds = array<i64: 1, 128>}, {pipeline_mode = #tpu.pipeline_mode<synchronous>, transform_indices = @transform_5, window_bounds = array<i64: 128, 10>}, {pipeline_mode = #tpu.pipeline_mode<synchronous>, transform_indices = @transform_6, window_bounds = array<i64: 1, 10>}, {transform_indices = @transform_7, window_bounds = array<i64: 8, 10>}]} {
    %c0 = arith.constant 0 : index
    %c0_0 = arith.constant 0 : index
    %0 = vector.load %arg2[%c0, %c0_0] : memref<144x256xbf16, #tpu.memory_space<vmem>>, vector<144x256xbf16>
    %c0_1 = arith.constant 0 : index
    %c0_2 = arith.constant 0 : index
    %c0_3 = arith.constant 0 : index
    %1 = vector.load %arg1[%c0_1, %c0_2, %c0_3] : memref<4x800x144xbf16, #tpu.memory_space<vmem>>, vector<1x800x144xbf16>
    %2 = vector.shape_cast %1 : vector<1x800x144xbf16> to vector<800x144xbf16>
    %cst = arith.constant dense<0.000000e+00> : vector<800x256xf32>
    %3 = tpu.matmul %2, %0, %cst {dimension_numbers = #tpu.dot_dimension_numbers<[1], [0], [0], [1], [0, 0, 1, 1], [], []>} : vector<800x144xbf16>, vector<144x256xbf16>, vector<800x256xf32> -> vector<800x256xf32>
    %4 = vector.extract_strided_slice %3 {offsets = [0, 0], sizes = [800, 128], strides = [1, 1]} : vector<800x256xf32> to vector<800x128xf32>
    %5 = vector.extract_strided_slice %3 {offsets = [0, 128], sizes = [800, 128], strides = [1, 1]} : vector<800x256xf32> to vector<800x128xf32>
    %6 = arith.maximumf %4, %5 : vector<800x128xf32>
    %7 = vector.extract_strided_slice %6 {offsets = [0, 0], sizes = [800, 64], strides = [1, 1]} : vector<800x128xf32> to vector<800x64xf32>
    %8 = vector.extract_strided_slice %6 {offsets = [0, 64], sizes = [800, 64], strides = [1, 1]} : vector<800x128xf32> to vector<800x64xf32>
    %9 = arith.maximumf %7, %8 : vector<800x64xf32>
    %c1 = arith.constant 1 : index
    %c0_4 = arith.constant 0 : index
    %c0_5 = arith.constant 0 : index
    %10 = vector.load %arg1[%c1, %c0_4, %c0_5] : memref<4x800x144xbf16, #tpu.memory_space<vmem>>, vector<1x800x144xbf16>
    %11 = vector.shape_cast %10 : vector<1x800x144xbf16> to vector<800x144xbf16>
    %cst_6 = arith.constant dense<0.000000e+00> : vector<800x256xf32>
    %12 = tpu.matmul %11, %0, %cst_6 {dimension_numbers = #tpu.dot_dimension_numbers<[1], [0], [0], [1], [0, 0, 1, 1], [], []>} : vector<800x144xbf16>, vector<144x256xbf16>, vector<800x256xf32> -> vector<800x256xf32>
    %13 = vector.extract_strided_slice %12 {offsets = [0, 0], sizes = [800, 128], strides = [1, 1]} : vector<800x256xf32> to vector<800x128xf32>
    %14 = vector.extract_strided_slice %12 {offsets = [0, 128], sizes = [800, 128], strides = [1, 1]} : vector<800x256xf32> to vector<800x128xf32>
    %15 = arith.maximumf %13, %14 : vector<800x128xf32>
    %16 = vector.extract_strided_slice %15 {offsets = [0, 0], sizes = [800, 64], strides = [1, 1]} : vector<800x128xf32> to vector<800x64xf32>
    %17 = vector.extract_strided_slice %15 {offsets = [0, 64], sizes = [800, 64], strides = [1, 1]} : vector<800x128xf32> to vector<800x64xf32>
    %18 = arith.maximumf %16, %17 : vector<800x64xf32>
    %19 = arith.maximumf %9, %18 : vector<800x64xf32>
    %c2 = arith.constant 2 : index
    %c0_7 = arith.constant 0 : index
    %c0_8 = arith.constant 0 : index
    %20 = vector.load %arg1[%c2, %c0_7, %c0_8] : memref<4x800x144xbf16, #tpu.memory_space<vmem>>, vector<1x800x144xbf16>
    %21 = vector.shape_cast %20 : vector<1x800x144xbf16> to vector<800x144xbf16>
    %cst_9 = arith.constant dense<0.000000e+00> : vector<800x256xf32>
    %22 = tpu.matmul %21, %0, %cst_9 {dimension_numbers = #tpu.dot_dimension_numbers<[1], [0], [0], [1], [0, 0, 1, 1], [], []>} : vector<800x144xbf16>, vector<144x256xbf16>, vector<800x256xf32> -> vector<800x256xf32>
    %23 = vector.extract_strided_slice %22 {offsets = [0, 0], sizes = [800, 128], strides = [1, 1]} : vector<800x256xf32> to vector<800x128xf32>
    %24 = vector.extract_strided_slice %22 {offsets = [0, 128], sizes = [800, 128], strides = [1, 1]} : vector<800x256xf32> to vector<800x128xf32>
    %25 = arith.maximumf %23, %24 : vector<800x128xf32>
    %26 = vector.extract_strided_slice %25 {offsets = [0, 0], sizes = [800, 64], strides = [1, 1]} : vector<800x128xf32> to vector<800x64xf32>
    %27 = vector.extract_strided_slice %25 {offsets = [0, 64], sizes = [800, 64], strides = [1, 1]} : vector<800x128xf32> to vector<800x64xf32>
    %28 = arith.maximumf %26, %27 : vector<800x64xf32>
    %29 = arith.maximumf %19, %28 : vector<800x64xf32>
    %c3 = arith.constant 3 : index
    %c0_10 = arith.constant 0 : index
    %c0_11 = arith.constant 0 : index
    %30 = vector.load %arg1[%c3, %c0_10, %c0_11] : memref<4x800x144xbf16, #tpu.memory_space<vmem>>, vector<1x800x144xbf16>
    %31 = vector.shape_cast %30 : vector<1x800x144xbf16> to vector<800x144xbf16>
    %cst_12 = arith.constant dense<0.000000e+00> : vector<800x256xf32>
    %32 = tpu.matmul %31, %0, %cst_12 {dimension_numbers = #tpu.dot_dimension_numbers<[1], [0], [0], [1], [0, 0, 1, 1], [], []>} : vector<800x144xbf16>, vector<144x256xbf16>, vector<800x256xf32> -> vector<800x256xf32>
    %33 = vector.extract_strided_slice %32 {offsets = [0, 0], sizes = [800, 128], strides = [1, 1]} : vector<800x256xf32> to vector<800x128xf32>
    %34 = vector.extract_strided_slice %32 {offsets = [0, 128], sizes = [800, 128], strides = [1, 1]} : vector<800x256xf32> to vector<800x128xf32>
    %35 = arith.maximumf %33, %34 : vector<800x128xf32>
    %36 = vector.extract_strided_slice %35 {offsets = [0, 0], sizes = [800, 64], strides = [1, 1]} : vector<800x128xf32> to vector<800x64xf32>
    %37 = vector.extract_strided_slice %35 {offsets = [0, 64], sizes = [800, 64], strides = [1, 1]} : vector<800x128xf32> to vector<800x64xf32>
    %38 = arith.maximumf %36, %37 : vector<800x64xf32>
    %39 = arith.maximumf %29, %38 : vector<800x64xf32>
    %c0_13 = arith.constant 0 : index
    %c0_14 = arith.constant 0 : index
    %40 = vector.load %arg3[%c0_13, %c0_14] : memref<1x64xf32, #tpu.memory_space<vmem>>, vector<1x64xf32>
    %41 = vector.broadcast %40 : vector<1x64xf32> to vector<800x64xf32>
    %42 = arith.addf %39, %41 : vector<800x64xf32>
    %cst_15 = arith.constant 0.000000e+00 : f32
    %43 = vector.broadcast %cst_15 : f32 to vector<800x64xf32>
    %44 = arith.maximumf %42, %43 : vector<800x64xf32>
    %45 = vector.shape_cast %44 : vector<800x64xf32> to vector<100x8x64xf32>
    %46 = arith.truncf %45 : vector<100x8x64xf32> to vector<100x8x64xbf16>
    %c0_16 = arith.constant 0 : index
    %c0_17 = arith.constant 0 : index
    %c0_18 = arith.constant 0 : index
    %47 = vector.load %arg4[%c0_16, %c0_17, %c0_18] : memref<100x64x128xbf16, #tpu.memory_space<vmem>>, vector<100x64x128xbf16>
    %cst_19 = arith.constant dense<0.000000e+00> : vector<100x8x128xf32>
    %48 = tpu.matmul %46, %47, %cst_19 {dimension_numbers = #tpu.dot_dimension_numbers<[2], [1], [1], [2], [0, 0, 0, 1, 1, 2], [0], [0]>} : vector<100x8x64xbf16>, vector<100x64x128xbf16>, vector<100x8x128xf32> -> vector<100x8x128xf32>
    %cst_20 = arith.constant dense<0.000000e+00> : vector<8x128xf32>
    %49 = vector.multi_reduction <add>, %48, %cst_20 [0] : vector<100x8x128xf32> to vector<8x128xf32>
    %c0_21 = arith.constant 0 : index
    %c0_22 = arith.constant 0 : index
    %50 = vector.load %arg5[%c0_21, %c0_22] : memref<1x128xf32, #tpu.memory_space<vmem>>, vector<1x128xf32>
    %51 = vector.broadcast %50 : vector<1x128xf32> to vector<8x128xf32>
    %52 = arith.addf %49, %51 : vector<8x128xf32>
    %cst_23 = arith.constant 0.000000e+00 : f32
    %53 = vector.broadcast %cst_23 : f32 to vector<8x128xf32>
    %54 = arith.maximumf %52, %53 : vector<8x128xf32>
    %c0_24 = arith.constant 0 : index
    %c0_25 = arith.constant 0 : index
    %55 = vector.load %arg6[%c0_24, %c0_25] : memref<128x10xf32, #tpu.memory_space<vmem>>, vector<128x10xf32>
    %cst_26 = arith.constant dense<0.000000e+00> : vector<8x10xf32>
    %56 = tpu.matmul %54, %55, %cst_26 {dimension_numbers = #tpu.dot_dimension_numbers<[1], [0], [0], [1], [0, 0, 1, 1], [], []>} : vector<8x128xf32>, vector<128x10xf32>, vector<8x10xf32> -> vector<8x10xf32>
    %c0_27 = arith.constant 0 : index
    %c0_28 = arith.constant 0 : index
    %57 = vector.load %arg7[%c0_27, %c0_28] : memref<1x10xf32, #tpu.memory_space<vmem>>, vector<1x10xf32>
    %58 = vector.broadcast %57 : vector<1x10xf32> to vector<8x10xf32>
    %59 = arith.addf %56, %58 : vector<8x10xf32>
    %cst_29 = arith.constant dense<0xFF800000> : vector<8xf32>
    %60 = vector.multi_reduction <maximumf>, %59, %cst_29 [1] : vector<8x10xf32> to vector<8xf32>
    %61 = vector.shape_cast %60 : vector<8xf32> to vector<8x1xf32>
    %62 = vector.broadcast %61 : vector<8x1xf32> to vector<8x10xf32>
    %63 = arith.subf %59, %62 : vector<8x10xf32>
    %64 = math.exp %63 : vector<8x10xf32>
    %cst_30 = arith.constant dense<0.000000e+00> : vector<8xf32>
    %65 = vector.multi_reduction <add>, %64, %cst_30 [1] : vector<8x10xf32> to vector<8xf32>
    %66 = vector.shape_cast %65 : vector<8xf32> to vector<8x1xf32>
    %67 = math.log %66 : vector<8x1xf32>
    %68 = vector.broadcast %67 : vector<8x1xf32> to vector<8x10xf32>
    %69 = arith.subf %63, %68 : vector<8x10xf32>
    %c0_31 = arith.constant 0 : index
    %c0_32 = arith.constant 0 : index
    %70 = vector.load %arg8[%c0_31, %c0_32] : memref<8x10xf32, #tpu.memory_space<vmem>>, vector<8x10xf32>
    tpu.vector_store %arg8[%c0_31, %c0_32], %69 {strides = array<i32>} : memref<8x10xf32, #tpu.memory_space<vmem>>, vector<8x10xf32>,
    return
  }
  func.func @transform_0(%arg0: i32) -> (i32, i32, i32) {
    %c0_i32 = arith.constant 0 : i32
    %c0_i32_0 = arith.constant 0 : i32
    %c0_i32_1 = arith.constant 0 : i32
    return %c0_i32, %arg0, %c0_i32_0 : i32, i32, i32
  }
  func.func @transform_1(%arg0: i32) -> (i32, i32) {
    %c0_i32 = arith.constant 0 : i32
    %c0_i32_0 = arith.constant 0 : i32
    %c0_i32_1 = arith.constant 0 : i32
    return %c0_i32, %c0_i32_0 : i32, i32
  }
  func.func @transform_2(%arg0: i32) -> (i32, i32) {
    %c0_i32 = arith.constant 0 : i32
    %c0_i32_0 = arith.constant 0 : i32
    %c0_i32_1 = arith.constant 0 : i32
    return %c0_i32, %c0_i32_0 : i32, i32
  }
  func.func @transform_3(%arg0: i32) -> (i32, i32, i32) {
    %c0_i32 = arith.constant 0 : i32
    %c0_i32_0 = arith.constant 0 : i32
    %c0_i32_1 = arith.constant 0 : i32
    %c0_i32_2 = arith.constant 0 : i32
    return %c0_i32, %c0_i32_0, %c0_i32_1 : i32, i32, i32
  }
  func.func @transform_4(%arg0: i32) -> (i32, i32) {
    %c0_i32 = arith.constant 0 : i32
    %c0_i32_0 = arith.constant 0 : i32
    %c0_i32_1 = arith.constant 0 : i32
    return %c0_i32, %c0_i32_0 : i32, i32
  }
  func.func @transform_5(%arg0: i32) -> (i32, i32) {
    %c0_i32 = arith.constant 0 : i32
    %c0_i32_0 = arith.constant 0 : i32
    %c0_i32_1 = arith.constant 0 : i32
    return %c0_i32, %c0_i32_0 : i32, i32
  }
  func.func @transform_6(%arg0: i32) -> (i32, i32) {
    %c0_i32 = arith.constant 0 : i32
    %c0_i32_0 = arith.constant 0 : i32
    %c0_i32_1 = arith.constant 0 : i32
    return %c0_i32, %c0_i32_0 : i32, i32
  }
  func.func @transform_7(%arg0: i32) -> (i32, i32) {
    %c0_i32 = arith.constant 0 : i32
    %c0_i32_0 = arith.constant 0 : i32
    return %arg0, %c0_i32 : i32, i32
  }
}

</mosaic_0001>

<llo_original>
// kernel: model_forward.1
$region0: #{model_forward.1}
  #allocation0 [shape = 'u32[]', space=smem, size = 0x4, offset = 0x4, fixed_abs, tag = 'smem constant byte address 0x4 - core index']
  #allocation1 [shape = 'u32[144,128]{1,0:T(1,128)}', space=vmem, size = 0x12000, scoped, tag = 'internal scratch']
  %s0 = inlined_call_operand.vmem [shape: bf16[4,800,144], index: 0, kind: input, shape index: {}]
  %s1 = inlined_call_operand.vmem [shape: bf16[144,256], index: 1, kind: input, shape index: {}]
  %s2 = inlined_call_operand.vmem [shape: f32[1,64], index: 2, kind: input, shape index: {}]
  %s3 = inlined_call_operand.vmem [shape: bf16[100,64,128], index: 3, kind: input, shape index: {}]
  %s4 = inlined_call_operand.vmem [shape: f32[1,128], index: 4, kind: input, shape index: {}]
  %s5 = inlined_call_operand.vmem [shape: f32[128,10], index: 5, kind: input, shape index: {}]
  %s6 = inlined_call_operand.vmem [shape: f32[1,10], index: 6, kind: input, shape index: {}]
  %s7 = inlined_call_operand.vmem [shape: f32[8,10], index: 7, kind: output, shape index: {}]
  %s8 = sld [smem:[#allocation0]]
  $region38: #{model_forward.1} parent=0
    _
  %s10 = ssub.s32 1, %s8
  %s11 = scalar_select 0, %s10, %s8
  // Predicated region
  $region2: #{model_forward.1} parent=0 // pred_check
    _
  $region3: #{model_forward.1} parent=0 // pred_check_branch
    %13 = sbr.rel (0) target = $region5
  $region4: #{model_forward.1} parent=0 // pred_region
    _
  $region5: #{model_forward.1} parent=0 // pred_fallthru
    _
  // Predicated region
  $region6: #{model_forward.1} parent=0 // pred_check
    _
  $region7: #{model_forward.1} parent=0 // pred_check_branch
    %15 = sbr.rel (0) target = $region9
  $region8: #{model_forward.1} parent=0 // pred_region
    _
  $region9: #{model_forward.1} parent=0 // pred_fallthru
    _
  // Predicated region
  $region10: #{model_forward.1} parent=0 // pred_check
    _
  $region11: #{model_forward.1} parent=0 // pred_check_branch
    %17 = sbr.rel (0) target = $region13
  $region12: #{model_forward.1} parent=0 // pred_region
    _
  $region13: #{model_forward.1} parent=0 // pred_fallthru
    _
  // Predicated region
  $region14: #{model_forward.1} parent=0 // pred_check
    _
  $region15: #{model_forward.1} parent=0 // pred_check_branch
    %19 = sbr.rel (0) target = $region17
  $region16: #{model_forward.1} parent=0 // pred_region
    _
  $region17: #{model_forward.1} parent=0 // pred_fallthru
    _
  // Predicated region
  $region18: #{model_forward.1} parent=0 // pred_check
    _
  $region19: #{model_forward.1} parent=0 // pred_check_branch
    %21 = sbr.rel (0) target = $region21
  $region20: #{model_forward.1} parent=0 // pred_region
    _
  $region21: #{model_forward.1} parent=0 // pred_fallthru
    _
  // Predicated region
  $region22: #{model_forward.1} parent=0 // pred_check
    _
  $region23: #{model_forward.1} parent=0 // pred_check_branch
    %23 = sbr.rel (0) target = $region25
  $region24: #{model_forward.1} parent=0 // pred_region
    _
  $region25: #{model_forward.1} parent=0 // pred_fallthru
    _
  // Predicated region
  $region26: #{model_forward.1} parent=0 // pred_check
    _
  $region27: #{model_forward.1} parent=0 // pred_check_branch
    %25 = sbr.rel (0) target = $region29
  $region28: #{model_forward.1} parent=0 // pred_region
    _
  $region29: #{model_forward.1} parent=0 // pred_fallthru
    _
  %v27 = vld [vmem:[%s1] sm:$0xff]
  %v28 = vld [vmem:[%s1 + $0x8] sm:$0xff]
  %v29 = vld [vmem:[%s1 + $0x10] sm:$0xff]
  %v30 = vld [vmem:[%s1 + $0x18] sm:$0xff]
  %v31 = vld [vmem:[%s1 + $0x20] sm:$0xff]
  %v32 = vld [vmem:[%s1 + $0x28] sm:$0xff]
  %v33 = vld [vmem:[%s1 + $0x30] sm:$0xff]
  %v34 = vld [vmem:[%s1 + $0x38] sm:$0xff]
  %v35 = vld [vmem:[%s1 + $0x40] sm:$0xff]
  %v36 = vld [vmem:[%s1 + $0x48] sm:$0xff]
  %v37 = vld [vmem:[%s1 + $0x50] sm:$0xff]
  %v38 = vld [vmem:[%s1 + $0x58] sm:$0xff]
  %v39 = vld [vmem:[%s1 + $0x60] sm:$0xff]
  %v40 = vld [vmem:[%s1 + $0x68] sm:$0xff]
  %v41 = vld [vmem:[%s1 + $0x70] sm:$0xff]
  %v42 = vld [vmem:[%s1 + $0x78] sm:$0xff]
  %v43 = vld [vmem:[%s1 + $0x80] sm:$0xff]
  %v44 = vld [vmem:[%s1 + $0x88] sm:$0xff]
  %v45 = vld [vmem:[%s0] sm:$0xff]
  %v46 = vld [vmem:[%s0 + $0x8] sm:$0xff]
  %v47 = vld [vmem:[%s0 + $0x10] sm:$0xff]
  %v48 = vld [vmem:[%s0 + $0x18] sm:$0xff]
  %v49 = vld [vmem:[%s0 + $0x20] sm:$0xff]
  %v50 = vld [vmem:[%s0 + $0x28] sm:$0xff]
  %v51 = vld [vmem:[%s0 + $0x30] sm:$0xff]
  %v52 = vld [vmem:[%s0 + $0x38] sm:$0xff]
  %v53 = vld [vmem:[%s0 + $0x40] sm:$0xff]
  %v54 = vld [vmem:[%s0 + $0x48] sm:$0xff]
  %v55 = vld [vmem:[%s0 + $0x50] sm:$0xff]
  %v56 = vld [vmem:[%s0 + $0x58] sm:$0xff]
  %v57 = vld [vmem:[%s0 + $0x60] sm:$0xff]
  %v58 = vld [vmem:[%s0 + $0x68] sm:$0xff]
  %v59 = vld [vmem:[%s0 + $0x70] sm:$0xff]
  %v60 = vld [vmem:[%s0 + $0x78] sm:$0xff]
  %v61 = vld [vmem:[%s0 + $0x80] sm:$0xff]
  %v62 = vld [vmem:[%s0 + $0x88] sm:$0xff]
  %v63 = vld [vmem:[%s0 + $0x90] sm:$0xff]
  %v64 = vld [vmem:[%s0 + $0x98] sm:$0xff]
  %v65 = vld [vmem:[%s0 + $0xa0] sm:$0xff]
  %v66 = vld [vmem:[%s0 + $0xa8] sm:$0xff]
  %v67 = vld [vmem:[%s0 + $0xb0] sm:$0xff]
  %v68 = vld [vmem:[%s0 + $0xb8] sm:$0xff]
  %v69 = vld [vmem:[%s0 + $0xc0] sm:$0xff]
  %v70 = vld [vmem:[%s0 + $0xc8] sm:$0xff]
  %v71 = vld [vmem:[%s0 + $0xd0] sm:$0xff]
  %v72 = vld [vmem:[%s0 + $0xd8] sm:$0xff]
  %v73 = vld [vmem:[%s0 + $0xe0] sm:$0xff]
  %v74 = vld [vmem:[%s0 + $0xe8] sm:$0xff]
  %v75 = vld [vmem:[%s0 + $0xf0] sm:$0xff]
  %v76 = vld [vmem:[%s0 + $0xf8] sm:$0xff]
  %v77 = vld [vmem:[%s0 + $0x100] sm:$0xff]
  %v78 = vld [vmem:[%s0 + $0x108] sm:$0xff]
  %v79 = vld [vmem:[%s0 + $0x110] sm:$0xff]
  %v80 = vld [vmem:[%s0 + $0x118] sm:$0xff]
  %v81 = vld [vmem:[%s0 + $0x120] sm:$0xff]
  %v82 = vld [vmem:[%s0 + $0x128] sm:$0xff]
  %v83 = vld [vmem:[%s0 + $0x130] sm:$0xff]
  %v84 = vld [vmem:[%s0 + $0x138] sm:$0xff]
  %v85 = vld [vmem:[%s0 + $0x140] sm:$0xff]
  %v86 = vld [vmem:[%s0 + $0x148] sm:$0xff]
  %v87 = vld [vmem:[%s0 + $0x150] sm:$0xff]
  %v88 = vld [vmem:[%s0 + $0x158] sm:$0xff]
  %v89 = vld [vmem:[%s0 + $0x160] sm:$0xff]
  %v90 = vld [vmem:[%s0 + $0x168] sm:$0xff]
  %v91 = vld [vmem:[%s0 + $0x170] sm:$0xff]
  %v92 = vld [vmem:[%s0 + $0x178] sm:$0xff]
  %v93 = vld [vmem:[%s0 + $0x180] sm:$0xff]
  %v94 = vld [vmem:[%s0 + $0x188] sm:$0xff]
  %v95 = vld [vmem:[%s0 + $0x190] sm:$0xff]
  %v96 = vld [vmem:[%s0 + $0x198] sm:$0xff]
  %v97 = vld [vmem:[%s0 + $0x1a0] sm:$0xff]
  %v98 = vld [vmem:[%s0 + $0x1a8] sm:$0xff]
  %v99 = vld [vmem:[%s0 + $0x1b0] sm:$0xff]
  %v100 = vld [vmem:[%s0 + $0x1b8] sm:$0xff]
  %v101 = vld [vmem:[%s0 + $0x1c0] sm:$0xff]
  %v102 = vld [vmem:[%s0 + $0x1c8] sm:$0xff]
  %v103 = vld [vmem:[%s0 + $0x1d0] sm:$0xff]
  %v104 = vld [vmem:[%s0 + $0x1d8] sm:$0xff]
  %v105 = vld [vmem:[%s0 + $0x1e0] sm:$0xff]
  %v106 = vld [vmem:[%s0 + $0x1e8] sm:$0xff]
  %v107 = vld [vmem:[%s0 + $0x1f0] sm:$0xff]
  %v108 = vld [vmem:[%s0 + $0x1f8] sm:$0xff]
  %v109 = vld [vmem:[%s0 + $0x200] sm:$0xff]
  %v110 = vld [vmem:[%s0 + $0x208] sm:$0xff]
  %v111 = vld [vmem:[%s0 + $0x210] sm:$0xff]
  %v112 = vld [vmem:[%s0 + $0x218] sm:$0xff]
  %v113 = vld [vmem:[%s0 + $0x220] sm:$0xff]
  %v114 = vld [vmem:[%s0 + $0x228] sm:$0xff]
  %v115 = vld [vmem:[%s0 + $0x230] sm:$0xff]
  %v116 = vld [vmem:[%s0 + $0x238] sm:$0xff]
  %v117 = vld [vmem:[%s0 + $0x240] sm:$0xff]
  %v118 = vld [vmem:[%s0 + $0x248] sm:$0xff]
  %v119 = vld [vmem:[%s0 + $0x250] sm:$0xff]
  %v120 = vld [vmem:[%s0 + $0x258] sm:$0xff]
  %v121 = vld [vmem:[%s0 + $0x260] sm:$0xff]
  %v122 = vld [vmem:[%s0 + $0x268] sm:$0xff]
  %v123 = vld [vmem:[%s0 + $0x270] sm:$0xff]
  %v124 = vld [vmem:[%s0 + $0x278] sm:$0xff]
  %v125 = vld [vmem:[%s0 + $0x280] sm:$0xff]
  %v126 = vld [vmem:[%s0 + $0x288] sm:$0xff]
  %v127 = vld [vmem:[%s0 + $0x290] sm:$0xff]
  %v128 = vld [vmem:[%s0 + $0x298] sm:$0xff]
  %v129 = vld [vmem:[%s0 + $0x2a0] sm:$0xff]
  %v130 = vld [vmem:[%s0 + $0x2a8] sm:$0xff]
  %v131 = vld [vmem:[%s0 + $0x2b0] sm:$0xff]
  %v132 = vld [vmem:[%s0 + $0x2b8] sm:$0xff]
  %v133 = vld [vmem:[%s0 + $0x2c0] sm:$0xff]
  %v134 = vld [vmem:[%s0 + $0x2c8] sm:$0xff]
  %v135 = vld [vmem:[%s0 + $0x2d0] sm:$0xff]
  %v136 = vld [vmem:[%s0 + $0x2d8] sm:$0xff]
  %v137 = vld [vmem:[%s0 + $0x2e0] sm:$0xff]
  %v138 = vld [vmem:[%s0 + $0x2e8] sm:$0xff]
  %v139 = vld [vmem:[%s0 + $0x2f0] sm:$0xff]
  %v140 = vld [vmem:[%s0 + $0x2f8] sm:$0xff]
  %v141 = vld [vmem:[%s0 + $0x300] sm:$0xff]
  %v142 = vld [vmem:[%s0 + $0x308] sm:$0xff]
  %v143 = vld [vmem:[%s0 + $0x310] sm:$0xff]
  %v144 = vld [vmem:[%s0 + $0x318] sm:$0xff]
  %v245 = vunpack.c.l.b16 %v45
  %v246 = vunpack.c.h.b16 %v45
  %v247 = vunpack.c.l.b16 %v46
  %v248 = vunpack.c.h.b16 %v46
  %v249 = vunpack.c.l.b16 %v47
  %v250 = vunpack.c.h.b16 %v47
  %v251 = vunpack.c.l.b16 %v48
  %v252 = vunpack.c.h.b16 %v48
  %v253 = vunpack.c.l.b16 %v49
  %v254 = vunpack.c.h.b16 %v49
  %v255 = vunpack.c.l.b16 %v50
  %v256 = vunpack.c.h.b16 %v50
  %v257 = vunpack.c.l.b16 %v51
  %v258 = vunpack.c.h.b16 %v51
  %v259 = vunpack.c.l.b16 %v52
  %v260 = vunpack.c.h.b16 %v52
  %v261 = vunpack.c.l.b16 %v53
  %v262 = vunpack.c.h.b16 %v53
  %v263 = vunpack.c.l.b16 %v54
  %v264 = vunpack.c.h.b16 %v54
  %v265 = vunpack.c.l.b16 %v55
  %v266 = vunpack.c.h.b16 %v55
  %v267 = vunpack.c.l.b16 %v56
  %v268 = vunpack.c.h.b16 %v56
  %v269 = vunpack.c.l.b16 %v57
  %v270 = vunpack.c.h.b16 %v57
  %v271 = vunpack.c.l.b16 %v58
  %v272 = vunpack.c.h.b16 %v58
  %v273 = vunpack.c.l.b16 %v59
  %v274 = vunpack.c.h.b16 %v59
  %v275 = vunpack.c.l.b16 %v60
  %v276 = vunpack.c.h.b16 %v60
  %v277 = vunpack.c.l.b16 %v61
  %v278 = vunpack.c.h.b16 %v61
  %v279 = vunpack.c.l.b16 %v62
  %v280 = vunpack.c.h.b16 %v62
  %v281 = vunpack.c.l.b16 %v63
  %v282 = vunpack.c.h.b16 %v63
  %v283 = vunpack.c.l.b16 %v64
  %v284 = vunpack.c.h.b16 %v64
  %v285 = vunpack.c.l.b16 %v65
  %v286 = vunpack.c.h.b16 %v65
  %v287 = vunpack.c.l.b16 %v66
  %v288 = vunpack.c.h.b16 %v66
  %v289 = vunpack.c.l.b16 %v67
  %v290 = vunpack.c.h.b16 %v67
  %v291 = vunpack.c.l.b16 %v68
  %v292 = vunpack.c.h.b16 %v68
  %v293 = vunpack.c.l.b16 %v69
  %v294 = vunpack.c.h.b16 %v69
  %v295 = vunpack.c.l.b16 %v70
  %v296 = vunpack.c.h.b16 %v70
  %v297 = vunpack.c.l.b16 %v71
  %v298 = vunpack.c.h.b16 %v71
  %v299 = vunpack.c.l.b16 %v72
  %v300 = vunpack.c.h.b16 %v72
  %v301 = vunpack.c.l.b16 %v73
  %v302 = vunpack.c.h.b16 %v73
  %v303 = vunpack.c.l.b16 %v74
  %v304 = vunpack.c.h.b16 %v74
  %v305 = vunpack.c.l.b16 %v75
  %v306 = vunpack.c.h.b16 %v75
  %v307 = vunpack.c.l.b16 %v76
  %v308 = vunpack.c.h.b16 %v76
  %v309 = vunpack.c.l.b16 %v77
  %v310 = vunpack.c.h.b16 %v77
  %v311 = vunpack.c.l.b16 %v78
  %v312 = vunpack.c.h.b16 %v78
  %v313 = vunpack.c.l.b16 %v79
  %v314 = vunpack.c.h.b16 %v79
  %v315 = vunpack.c.l.b16 %v80
  %v316 = vunpack.c.h.b16 %v80
  %v317 = vunpack.c.l.b16 %v81
  %v318 = vunpack.c.h.b16 %v81
  %v319 = vunpack.c.l.b16 %v82
  %v320 = vunpack.c.h.b16 %v82
  %v321 = vunpack.c.l.b16 %v83
  %v322 = vunpack.c.h.b16 %v83
  %v323 = vunpack.c.l.b16 %v84
  %v324 = vunpack.c.h.b16 %v84
  %v325 = vunpack.c.l.b16 %v85
  %v326 = vunpack.c.h.b16 %v85
  %v327 = vunpack.c.l.b16 %v86
  %v328 = vunpack.c.h.b16 %v86
  %v329 = vunpack.c.l.b16 %v87
  %v330 = vunpack.c.h.b16 %v87
  %v331 = vunpack.c.l.b16 %v88
  %v332 = vunpack.c.h.b16 %v88
  %v333 = vunpack.c.l.b16 %v89
  %v334 = vunpack.c.h.b16 %v89
  %v335 = vunpack.c.l.b16 %v90
  %v336 = vunpack.c.h.b16 %v90
  %v337 = vunpack.c.l.b16 %v91
  %v338 = vunpack.c.h.b16 %v91
  %v339 = vunpack.c.l.b16 %v92
  %v340 = vunpack.c.h.b16 %v92
  %v341 = vunpack.c.l.b16 %v93
  %v342 = vunpack.c.h.b16 %v93
  %v343 = vunpack.c.l.b16 %v94
  %v344 = vunpack.c.h.b16 %v94
  %v345 = vunpack.c.l.b16 %v95
  %v346 = vunpack.c.h.b16 %v95
  %v347 = vunpack.c.l.b16 %v96
  %v348 = vunpack.c.h.b16 %v96
  %v349 = vunpack.c.l.b16 %v97
  %v350 = vunpack.c.h.b16 %v97
  %v351 = vunpack.c.l.b16 %v98
  %v352 = vunpack.c.h.b16 %v98
  %v353 = vunpack.c.l.b16 %v99
  %v354 = vunpack.c.h.b16 %v99
  %v355 = vunpack.c.l.b16 %v100
  %v356 = vunpack.c.h.b16 %v100
  %v357 = vunpack.c.l.b16 %v101
  %v358 = vunpack.c.h.b16 %v101
  %v359 = vunpack.c.l.b16 %v102
  %v360 = vunpack.c.h.b16 %v102
  %v361 = vunpack.c.l.b16 %v103
  %v362 = vunpack.c.h.b16 %v103
  %v363 = vunpack.c.l.b16 %v104
  %v364 = vunpack.c.h.b16 %v104
  %v365 = vunpack.c.l.b16 %v105
  %v366 = vunpack.c.h.b16 %v105
  %v367 = vunpack.c.l.b16 %v106
  %v368 = vunpack.c.h.b16 %v106
  %v369 = vunpack.c.l.b16 %v107
  %v370 = vunpack.c.h.b16 %v107
  %v371 = vunpack.c.l.b16 %v108
  %v372 = vunpack.c.h.b16 %v108
  %v373 = vunpack.c.l.b16 %v109
  %v374 = vunpack.c.h.b16 %v109
  %v375 = vunpack.c.l.b16 %v110
  %v376 = vunpack.c.h.b16 %v110
  %v377 = vunpack.c.l.b16 %v111
  %v378 = vunpack.c.h.b16 %v111
  %v379 = vunpack.c.l.b16 %v112
  %v380 = vunpack.c.h.b16 %v112
  %v381 = vunpack.c.l.b16 %v113
  %v382 = vunpack.c.h.b16 %v113
  %v383 = vunpack.c.l.b16 %v114
  %v384 = vunpack.c.h.b16 %v114
  %v385 = vunpack.c.l.b16 %v115
  %v386 = vunpack.c.h.b16 %v115
  %v387 = vunpack.c.l.b16 %v116
  %v388 = vunpack.c.h.b16 %v116
  %v389 = vunpack.c.l.b16 %v117
  %v390 = vunpack.c.h.b16 %v117
  %v391 = vunpack.c.l.b16 %v118
  %v392 = vunpack.c.h.b16 %v118
  %v393 = vunpack.c.l.b16 %v119
  %v394 = vunpack.c.h.b16 %v119
  %v395 = vunpack.c.l.b16 %v120
  %v396 = vunpack.c.h.b16 %v120
  %v397 = vunpack.c.l.b16 %v121
  %v398 = vunpack.c.h.b16 %v121
  %v399 = vunpack.c.l.b16 %v122
  %v400 = vunpack.c.h.b16 %v122
  %v401 = vunpack.c.l.b16 %v123
  %v402 = vunpack.c.h.b16 %v123
  %v403 = vunpack.c.l.b16 %v124
  %v404 = vunpack.c.h.b16 %v124
  %v405 = vunpack.c.l.b16 %v125
  %v406 = vunpack.c.h.b16 %v125
  %v407 = vunpack.c.l.b16 %v126
  %v408 = vunpack.c.h.b16 %v126
  %v409 = vunpack.c.l.b16 %v127
  %v410 = vunpack.c.h.b16 %v127
  %v411 = vunpack.c.l.b16 %v128
  %v412 = vunpack.c.h.b16 %v128
  %v413 = vunpack.c.l.b16 %v129
  %v414 = vunpack.c.h.b16 %v129
  %v415 = vunpack.c.l.b16 %v130
  %v416 = vunpack.c.h.b16 %v130
  %v417 = vunpack.c.l.b16 %v131
  %v418 = vunpack.c.h.b16 %v131
  %v419 = vunpack.c.l.b16 %v132
  %v420 = vunpack.c.h.b16 %v132
  %v421 = vunpack.c.l.b16 %v133
  %v422 = vunpack.c.h.b16 %v133
  %v423 = vunpack.c.l.b16 %v134
  %v424 = vunpack.c.h.b16 %v134
  %v425 = vunpack.c.l.b16 %v135
  %v426 = vunpack.c.h.b16 %v135
  %v427 = vunpack.c.l.b16 %v136
  %v428 = vunpack.c.h.b16 %v136
  %v429 = vunpack.c.l.b16 %v137
  %v430 = vunpack.c.h.b16 %v137
  %v431 = vunpack.c.l.b16 %v138
  %v432 = vunpack.c.h.b16 %v138
  %v433 = vunpack.c.l.b16 %v139
  %v434 = vunpack.c.h.b16 %v139
  %v435 = vunpack.c.l.b16 %v140
  %v436 = vunpack.c.h.b16 %v140
  %v437 = vunpack.c.l.b16 %v141
  %v438 = vunpack.c.h.b16 %v141
  %v439 = vunpack.c.l.b16 %v142
  %v440 = vunpack.c.h.b16 %v142
  %v441 = vunpack.c.l.b16 %v143
  %v442 = vunpack.c.h.b16 %v143
  %v443 = vunpack.c.l.b16 %v144
  %v444 = vunpack.c.h.b16 %v144
  %v445 = vpack.c.b16 %v247, %v245
  %v446 = vpack.c.b16 %v248, %v246
  %v447 = vpack.c.b16 %v251, %v249
  %v448 = vpack.c.b16 %v252, %v250
  %v449 = vpack.c.b16 %v255, %v253
  %v450 = vpack.c.b16 %v256, %v254
  %v451 = vpack.c.b16 %v259, %v257
  %v452 = vpack.c.b16 %v260, %v258
  %v453 = vpack.c.b16 %v263, %v261
  %v454 = vpack.c.b16 %v264, %v262
  %v455 = vpack.c.b16 %v267, %v265
  %v456 = vpack.c.b16 %v268, %v266
  %v457 = vpack.c.b16 %v271, %v269
  %v458 = vpack.c.b16 %v272, %v270
  %v459 = vpack.c.b16 %v275, %v273
  %v460 = vpack.c.b16 %v276, %v274
  %v461 = vpack.c.b16 %v279, %v277
  %v462 = vpack.c.b16 %v280, %v278
  %v463 = vpack.c.b16 %v283, %v281
  %v464 = vpack.c.b16 %v284, %v282
  %v465 = vpack.c.b16 %v287, %v285
  %v466 = vpack.c.b16 %v288, %v286
  %v467 = vpack.c.b16 %v291, %v289
  %v468 = vpack.c.b16 %v292, %v290
  %v469 = vpack.c.b16 %v295, %v293
  %v470 = vpack.c.b16 %v296, %v294
  %v471 = vpack.c.b16 %v299, %v297
  %v472 = vpack.c.b16 %v300, %v298
  %v473 = vpack.c.b16 %v303, %v301
  %v474 = vpack.c.b16 %v304, %v302
  %v475 = vpack.c.b16 %v307, %v305
  %v476 = vpack.c.b16 %v308, %v306
  %v477 = vpack.c.b16 %v311, %v309
  %v478 = vpack.c.b16 %v312, %v310
  %v479 = vpack.c.b16 %v315, %v313
  %v480 = vpack.c.b16 %v316, %v314
  %v481 = vpack.c.b16 %v319, %v317
  %v482 = vpack.c.b16 %v320, %v318
  %v483 = vpack.c.b16 %v323, %v321
  %v484 = vpack.c.b16 %v324, %v322
  %v485 = vpack.c.b16 %v327, %v325
  %v486 = vpack.c.b16 %v328, %v326
  %v487 = vpack.c.b16 %v331, %v329
  %v488 = vpack.c.b16 %v332, %v330
  %v489 = vpack.c.b16 %v335, %v333
  %v490 = vpack.c.b16 %v336, %v334
  %v491 = vpack.c.b16 %v339, %v337
  %v492 = vpack.c.b16 %v340, %v338
  %v493 = vpack.c.b16 %v343, %v341
  %v494 = vpack.c.b16 %v344, %v342
  %v495 = vpack.c.b16 %v347, %v345
  %v496 = vpack.c.b16 %v348, %v346
  %v497 = vpack.c.b16 %v351, %v349
  %v498 = vpack.c.b16 %v352, %v350
  %v499 = vpack.c.b16 %v355, %v353
  %v500 = vpack.c.b16 %v356, %v354
  %v501 = vpack.c.b16 %v359, %v357
  %v502 = vpack.c.b16 %v360, %v358
  %v503 = vpack.c.b16 %v363, %v361
  %v504 = vpack.c.b16 %v364, %v362
  %v505 = vpack.c.b16 %v367, %v365
  %v506 = vpack.c.b16 %v368, %v366
  %v507 = vpack.c.b16 %v371, %v369
  %v508 = vpack.c.b16 %v372, %v370
  %v509 = vpack.c.b16 %v375, %v373
  %v510 = vpack.c.b16 %v376, %v374
  %v511 = vpack.c.b16 %v379, %v377
  %v512 = vpack.c.b16 %v380, %v378
  %v513 = vpack.c.b16 %v383, %v381
  %v514 = vpack.c.b16 %v384, %v382
  %v515 = vpack.c.b16 %v387, %v385
  %v516 = vpack.c.b16 %v388, %v386
  %v517 = vpack.c.b16 %v391, %v389
  %v518 = vpack.c.b16 %v392, %v390
  %v519 = vpack.c.b16 %v395, %v393
  %v520 = vpack.c.b16 %v396, %v394
  %v521 = vpack.c.b16 %v399, %v397
  %v522 = vpack.c.b16 %v400, %v398
  %v523 = vpack.c.b16 %v403, %v401
  %v524 = vpack.c.b16 %v404, %v402
  %v525 = vpack.c.b16 %v407, %v405
  %v526 = vpack.c.b16 %v408, %v406
  %v527 = vpack.c.b16 %v411, %v409
  %v528 = vpack.c.b16 %v412, %v410
  %v529 = vpack.c.b16 %v415, %v413
  %v530 = vpack.c.b16 %v416, %v414
  %v531 = vpack.c.b16 %v419, %v417
  %v532 = vpack.c.b16 %v420, %v418
  %v533 = vpack.c.b16 %v423, %v421
  %v534 = vpack.c.b16 %v424, %v422
  %v535 = vpack.c.b16 %v427, %v425
  %v536 = vpack.c.b16 %v428, %v426
  %v537 = vpack.c.b16 %v431, %v429
  %v538 = vpack.c.b16 %v432, %v430
  %v539 = vpack.c.b16 %v435, %v433
  %v540 = vpack.c.b16 %v436, %v434
  %v541 = vpack.c.b16 %v439, %v437
  %v542 = vpack.c.b16 %v440, %v438
  %v543 = vpack.c.b16 %v443, %v441
  %v544 = vpack.c.b16 %v444, %v442
  %v613 = vunpack.c.l.b16 %v27
  %v614 = vunpack.c.h.b16 %v27
  %v615 = vunpack.c.l.b16 %v28
  %v616 = vunpack.c.h.b16 %v28
  %v617 = vunpack.c.l.b16 %v29
  %v618 = vunpack.c.h.b16 %v29
  %v619 = vunpack.c.l.b16 %v30
  %v620 = vunpack.c.h.b16 %v30
  %v621 = vunpack.c.l.b16 %v31
  %v622 = vunpack.c.h.b16 %v31
  %v623 = vunpack.c.l.b16 %v32
  %v624 = vunpack.c.h.b16 %v32
  %v625 = vunpack.c.l.b16 %v33
  %v626 = vunpack.c.h.b16 %v33
  %v627 = vunpack.c.l.b16 %v34
  %v628 = vunpack.c.h.b16 %v34
  %v629 = vunpack.c.l.b16 %v35
  %v630 = vunpack.c.h.b16 %v35
  %v631 = vunpack.c.l.b16 %v36
  %v632 = vunpack.c.h.b16 %v36
  %v633 = vunpack.c.l.b16 %v37
  %v634 = vunpack.c.h.b16 %v37
  %v635 = vunpack.c.l.b16 %v38
  %v636 = vunpack.c.h.b16 %v38
  %v637 = vunpack.c.l.b16 %v39
  %v638 = vunpack.c.h.b16 %v39
  %v639 = vunpack.c.l.b16 %v40
  %v640 = vunpack.c.h.b16 %v40
  %v641 = vunpack.c.l.b16 %v41
  %v642 = vunpack.c.h.b16 %v41
  %v643 = vunpack.c.l.b16 %v42
  %v644 = vunpack.c.h.b16 %v42
  %v645 = vunpack.c.l.b16 %v43
  %v646 = vunpack.c.h.b16 %v43
  %v647 = vunpack.c.l.b16 %v44
  %v648 = vunpack.c.h.b16 %v44
  %v649 = vpack.c.b16 %v615, %v613
  %v650 = vpack.c.b16 %v616, %v614
  %v651 = vpack.c.b16 %v619, %v617
  %v652 = vpack.c.b16 %v620, %v618
  %v653 = vpack.c.b16 %v623, %v621
  %v654 = vpack.c.b16 %v624, %v622
  %v655 = vpack.c.b16 %v627, %v625
  %v656 = vpack.c.b16 %v628, %v626
  %v657 = vpack.c.b16 %v631, %v629
  %v658 = vpack.c.b16 %v632, %v630
  %v659 = vpack.c.b16 %v635, %v633
  %v660 = vpack.c.b16 %v636, %v634
  %v661 = vpack.c.b16 %v639, %v637
  %v662 = vpack.c.b16 %v640, %v638
  %v663 = vpack.c.b16 %v643, %v641
  %v664 = vpack.c.b16 %v644, %v642
  %v665 = vpack.c.b16 %v647, %v645
  %v666 = vpack.c.b16 %v648, %v646
  %vm685 = vcmask 130048
  %v687 = vsel %vm685, %v446, 0
  %v690 = vsel %vm685, %v448, 0
  %v693 = vsel %vm685, %v450, 0
  %v696 = vsel %vm685, %v452, 0
  %v699 = vsel %vm685, %v454, 0
  %v702 = vsel %vm685, %v456, 0
  %v705 = vsel %vm685, %v458, 0
  %v708 = vsel %vm685, %v460, 0
  %v711 = vsel %vm685, %v462, 0
  %v714 = vsel %vm685, %v464, 0
  %v717 = vsel %vm685, %v466, 0
  %v720 = vsel %vm685, %v468, 0
  %v723 = vsel %vm685, %v470, 0
  %v726 = vsel %vm685, %v472, 0
  %v729 = vsel %vm685, %v474, 0
  %v732 = vsel %vm685, %v476, 0
  %v735 = vsel %vm685, %v478, 0
  %v738 = vsel %vm685, %v480, 0
  %v741 = vsel %vm685, %v482, 0
  %v744 = vsel %vm685, %v484, 0
  %v747 = vsel %vm685, %v486, 0
  %v750 = vsel %vm685, %v488, 0
  %v753 = vsel %vm685, %v490, 0
  %v756 = vsel %vm685, %v492, 0
  %v759 = vsel %vm685, %v494, 0
  %v762 = vsel %vm685, %v496, 0
  %v765 = vsel %vm685, %v498, 0
  %v768 = vsel %vm685, %v500, 0
  %v771 = vsel %vm685, %v502, 0
  %v774 = vsel %vm685, %v504, 0
  %v777 = vsel %vm685, %v506, 0
  %v780 = vsel %vm685, %v508, 0
  %v783 = vsel %vm685, %v510, 0
  %v786 = vsel %vm685, %v512, 0
  %v789 = vsel %vm685, %v514, 0
  %v792 = vsel %vm685, %v516, 0
  %v795 = vsel %vm685, %v518, 0
  %v798 = vsel %vm685, %v520, 0
  %v801 = vsel %vm685, %v522, 0
  %v804 = vsel %vm685, %v524, 0
  %v807 = vsel %vm685, %v526, 0
  %v810 = vsel %vm685, %v528, 0
  %v813 = vsel %vm685, %v530, 0
  %v816 = vsel %vm685, %v532, 0
  %v819 = vsel %vm685, %v534, 0
  %v822 = vsel %vm685, %v536, 0
  %v825 = vsel %vm685, %v538, 0
  %v828 = vsel %vm685, %v540, 0
  %v831 = vsel %vm685, %v542, 0
  %v834 = vsel %vm685, %v544, 0
  %836 = vmatprep.subr.bf16.mxu0 %v650
  %837 = vmatpush1.bf16.msra.mxu0 %v649
  %838 = vmatprep.subr.bf16.mxu0 %v652
  %839 = vmatpush1.bf16.msra.mxu0 %v651
  %840 = vmatprep.subr.bf16.mxu0 %v654
  %841 = vmatpush1.bf16.msra.mxu0 %v653
  %842 = vmatprep.subr.bf16.mxu0 %v656
  %843 = vmatpush1.bf16.msra.mxu0 %v655
  %844 = vmatprep.subr.bf16.mxu0 %v658
  %845 = vmatpush1.bf16.msra.mxu0 %v657
  %846 = vmatprep.subr.bf16.mxu0 %v660
  %847 = vmatpush1.bf16.msra.mxu0 %v659
  %848 = vmatprep.subr.bf16.mxu0 %v662
  %849 = vmatpush1.bf16.msra.mxu0 %v661
  %850 = vmatprep.subr.bf16.mxu0 %v664
  %851 = vmatpush1.bf16.msra.mxu0 %v663
  %852 = vmatprep.subr.bf16.mxu0 %v666
  %853 = vmatpush1.bf16.msra.mxu0 %v665
  %854 = vmatprep.subr.bf16.mxu0 0
  %855 = vmatpush1.bf16.msra.mxu0 0
  %856 = vmatprep.subr.bf16.mxu0 0
  %857 = vmatpush1.bf16.msra.mxu0 0
  %858 = vmatprep.subr.bf16.mxu0 0
  %859 = vmatpush1.bf16.msra.mxu0 0
  %860 = vmatprep.subr.bf16.mxu0 0
  %861 = vmatpush1.bf16.msra.mxu0 0
  %862 = vmatprep.subr.bf16.mxu0 0
  %863 = vmatpush1.bf16.msra.mxu0 0
  %864 = vmatprep.subr.bf16.mxu0 0
  %865 = vmatpush1.bf16.msra.mxu0 0
  %866 = vmatprep.subr.bf16.mxu0 0
  %867 = vmatpush1.bf16.msra.mxu0 0
  %868 = vmatprep.mubr.bf16.mxu0 %v687
  %869 = vmatmul.mubr.bf16.gmra.mrb[0].mxu0 %v445
  %v870 = vpop.f32.mrb[0].mxu0
  %v871 = vadd.f32 0.0, %v870
  %v872 = vpop.f32.mrb[0].mxu0
  %v873 = vadd.f32 0.0, %v872
  %v874 = vpop.f32.mrb[0].mxu0
  %v875 = vadd.f32 0.0, %v874
  %v876 = vpop.f32.mrb[0].mxu0
  %v877 = vadd.f32 0.0, %v876
  %878 = vmatprep.mubr.bf16.mxu0 %v690
  %879 = vmatmul.mubr.bf16.gmra.mrb[0].mxu0 %v447
  %v880 = vpop.f32.mrb[0].mxu0
  %v881 = vadd.f32 0.0, %v880
  %v882 = vpop.f32.mrb[0].mxu0
  %v883 = vadd.f32 0.0, %v882
  %v884 = vpop.f32.mrb[0].mxu0
  %v885 = vadd.f32 0.0, %v884
  %v886 = vpop.f32.mrb[0].mxu0
  %v887 = vadd.f32 0.0, %v886
  %888 = vmatprep.mubr.bf16.mxu0 %v693
  %889 = vmatmul.mubr.bf16.gmra.mrb[0].mxu0 %v449
  %v890 = vpop.f32.mrb[0].mxu0
  %v891 = vadd.f32 0.0, %v890
  %v892 = vpop.f32.mrb[0].mxu0
  %v893 = vadd.f32 0.0, %v892
  %v894 = vpop.f32.mrb[0].mxu0
  %v895 = vadd.f32 0.0, %v894
  %v896 = vpop.f32.mrb[0].mxu0
  %v897 = vadd.f32 0.0, %v896
  %898 = vmatprep.mubr.bf16.mxu0 %v696
  %899 = vmatmul.mubr.bf16.gmra.mrb[0].mxu0 %v451
  %v900 = vpop.f32.mrb[0].mxu0
  %v901 = vadd.f32 0.0, %v900
  %v902 = vpop.f32.mrb[0].mxu0
  %v903 = vadd.f32 0.0, %v902
  %v904 = vpop.f32.mrb[0].mxu0
  %v905 = vadd.f32 0.0, %v904
  %v906 = vpop.f32.mrb[0].mxu0
  %v907 = vadd.f32 0.0, %v906
  %908 = vmatprep.mubr.bf16.mxu0 %v699
  %909 = vmatmul.mubr.bf16.gmra.mrb[0].mxu0 %v453
  %v910 = vpop.f32.mrb[0].mxu0
  %v911 = vadd.f32 0.0, %v910
  %v912 = vpop.f32.mrb[0].mxu0
  %v913 = vadd.f32 0.0, %v912
  %v914 = vpop.f32.mrb[0].mxu0
  %v915 = vadd.f32 0.0, %v914
  %v916 = vpop.f32.mrb[0].mxu0
  %v917 = vadd.f32 0.0, %v916
  %918 = vmatprep.mubr.bf16.mxu0 %v702
  %919 = vmatmul.mubr.bf16.gmra.mrb[0].mxu0 %v455
  %v920 = vpop.f32.mrb[0].mxu0
  %v921 = vadd.f32 0.0, %v920
  %v922 = vpop.f32.mrb[0].mxu0
  %v923 = vadd.f32 0.0, %v922
  %v924 = vpop.f32.mrb[0].mxu0
  %v925 = vadd.f32 0.0, %v924
  %v926 = vpop.f32.mrb[0].mxu0
  %v927 = vadd.f32 0.0, %v926
  %928 = vmatprep.mubr.bf16.mxu0 %v705
  %929 = vmatmul.mubr.bf16.gmra.mrb[0].mxu0 %v457
  %v930 = vpop.f32.mrb[0].mxu0
  %v931 = vadd.f32 0.0, %v930
  %v932 = vpop.f32.mrb[0].mxu0
  %v933 = vadd.f32 0.0, %v932
  %v934 = vpop.f32.mrb[0].mxu0
  %v935 = vadd.f32 0.0, %v934
  %v936 = vpop.f32.mrb[0].mxu0
  %v937 = vadd.f32 0.0, %v936
  %938 = vmatprep.mubr.bf16.mxu0 %v708
  %939 = vmatmul.mubr.bf16.gmra.mrb[0].mxu0 %v459
  %v940 = vpop.f32.mrb[0].mxu0
  %v941 = vadd.f32 0.0, %v940
  %v942 = vpop.f32.mrb[0].mxu0
  %v943 = vadd.f32 0.0, %v942
  %v944 = vpop.f32.mrb[0].mxu0
  %v945 = vadd.f32 0.0, %v944
  %v946 = vpop.f32.mrb[0].mxu0
  %v947 = vadd.f32 0.0, %v946
  %948 = vmatprep.mubr.bf16.mxu0 %v711
  %949 = vmatmul.mubr.bf16.gmra.mrb[0].mxu0 %v461
  %v950 = vpop.f32.mrb[0].mxu0
  %v951 = vadd.f32 0.0, %v950
  %v952 = vpop.f32.mrb[0].mxu0
  %v953 = vadd.f32 0.0, %v952
  %v954 = vpop.f32.mrb[0].mxu0
  %v955 = vadd.f32 0.0, %v954
  %v956 = vpop.f32.mrb[0].mxu0
  %v957 = vadd.f32 0.0, %v956
  %958 = vmatprep.mubr.bf16.mxu0 %v714
  %959 = vmatmul.mubr.bf16.gmra.mrb[0].mxu0 %v463
  %v960 = vpop.f32.mrb[0].mxu0
  %v961 = vadd.f32 0.0, %v960
  %v962 = vpop.f32.mrb[0].mxu0
  %v963 = vadd.f32 0.0, %v962
  %v964 = vpop.f32.mrb[0].mxu0
  %v965 = vadd.f32 0.0, %v964
  %v966 = vpop.f32.mrb[0].mxu0
  %v967 = vadd.f32 0.0, %v966
  %968 = vmatprep.mubr.bf16.mxu0 %v717
  %969 = vmatmul.mubr.bf16.gmra.mrb[0].mxu0 %v465
  %v970 = vpop.f32.mrb[0].mxu0
  %v971 = vadd.f32 0.0, %v970
  %v972 = vpop.f32.mrb[0].mxu0
  %v973 = vadd.f32 0.0, %v972
  %v974 = vpop.f32.mrb[0].mxu0
  %v975 = vadd.f32 0.0, %v974
  %v976 = vpop.f32.mrb[0].mxu0
  %v977 = vadd.f32 0.0, %v976
  %978 = vmatprep.mubr.bf16.mxu0 %v720
  %979 = vmatmul.mubr.bf16.gmra.mrb[0].mxu0 %v467
  %v980 = vpop.f32.mrb[0].mxu0
  %v981 = vadd.f32 0.0, %v980
  %v982 = vpop.f32.mrb[0].mxu0
  %v983 = vadd.f32 0.0, %v982
  %v984 = vpop.f32.mrb[0].mxu0
  %v985 = vadd.f32 0.0, %v984
  %v986 = vpop.f32.mrb[0].mxu0
  %v987 = vadd.f32 0.0, %v986
  %988 = vmatprep.mubr.bf16.mxu0 %v723
  %989 = vmatmul.mubr.bf16.gmra.mrb[0].mxu0 %v469
  %v990 = vpop.f32.mrb[0].mxu0
  %v991 = vadd.f32 0.0, %v990
  %v992 = vpop.f32.mrb[0].mxu0
  %v993 = vadd.f32 0.0, %v992
  %v994 = vpop.f32.mrb[0].mxu0
  %v995 = vadd.f32 0.0, %v994
  %v996 = vpop.f32.mrb[0].mxu0
  %v997 = vadd.f32 0.0, %v996
  %998 = vmatprep.mubr.bf16.mxu0 %v726
  %999 = vmatmul.mubr.bf16.gmra.mrb[0].mxu0 %v471
  %v1000 = vpop.f32.mrb[0].mxu0
  %v1001 = vadd.f32 0.0, %v1000
  %v1002 = vpop.f32.mrb[0].mxu0
  %v1003 = vadd.f32 0.0, %v1002
  %v1004 = vpop.f32.mrb[0].mxu0
  %v1005 = vadd.f32 0.0, %v1004
  %v1006 = vpop.f32.mrb[0].mxu0
  %v1007 = vadd.f32 0.0, %v1006
  %1008 = vmatprep.mubr.bf16.mxu0 %v729
  %1009 = vmatmul.mubr.bf16.gmra.mrb[0].mxu0 %v473
  %v1010 = vpop.f32.mrb[0].mxu0
  %v1011 = vadd.f32 0.0, %v1010
  %v1012 = vpop.f32.mrb[0].mxu0
  %v1013 = vadd.f32 0.0, %v1012
  %v1014 = vpop.f32.mrb[0].mxu0
  %v1015 = vadd.f32 0.0, %v1014
  %v1016 = vpop.f32.mrb[0].mxu0
  %v1017 = vadd.f32 0.0, %v1016
  %1018 = vmatprep.mubr.bf16.mxu0 %v732
  %1019 = vmatmul.mubr.bf16.gmra.mrb[0].mxu0 %v475
  %v1020 = vpop.f32.mrb[0].mxu0
  %v1021 = vadd.f32 0.0, %v1020
  %v1022 = vpop.f32.mrb[0].mxu0
  %v1023 = vadd.f32 0.0, %v1022
  %v1024 = vpop.f32.mrb[0].mxu0
  %v1025 = vadd.f32 0.0, %v1024
  %v1026 = vpop.f32.mrb[0].mxu0
  %v1027 = vadd.f32 0.0, %v1026
  %1028 = vmatprep.mubr.bf16.mxu0 %v735
  %1029 = vmatmul.mubr.bf16.gmra.mrb[0].mxu0 %v477
  %v1030 = vpop.f32.mrb[0].mxu0
  %v1031 = vadd.f32 0.0, %v1030
  %v1032 = vpop.f32.mrb[0].mxu0
  %v1033 = vadd.f32 0.0, %v1032
  %v1034 = vpop.f32.mrb[0].mxu0
  %v1035 = vadd.f32 0.0, %v1034
  %v1036 = vpop.f32.mrb[0].mxu0
  %v1037 = vadd.f32 0.0, %v1036
  %1038 = vmatprep.mubr.bf16.mxu0 %v738
  %1039 = vmatmul.mubr.bf16.gmra.mrb[0].mxu0 %v479
  %v1040 = vpop.f32.mrb[0].mxu0
  %v1041 = vadd.f32 0.0, %v1040
  %v1042 = vpop.f32.mrb[0].mxu0
  %v1043 = vadd.f32 0.0, %v1042
  %v1044 = vpop.f32.mrb[0].mxu0
  %v1045 = vadd.f32 0.0, %v1044
  %v1046 = vpop.f32.mrb[0].mxu0
  %v1047 = vadd.f32 0.0, %v1046
  %1048 = vmatprep.mubr.bf16.mxu0 %v741
  %1049 = vmatmul.mubr.bf16.gmra.mrb[0].mxu0 %v481
  %v1050 = vpop.f32.mrb[0].mxu0
  %v1051 = vadd.f32 0.0, %v1050
  %v1052 = vpop.f32.mrb[0].mxu0
  %v1053 = vadd.f32 0.0, %v1052
  %v1054 = vpop.f32.mrb[0].mxu0
  %v1055 = vadd.f32 0.0, %v1054
  %v1056 = vpop.f32.mrb[0].mxu0
  %v1057 = vadd.f32 0.0, %v1056
  %1058 = vmatprep.mubr.bf16.mxu0 %v744
  %1059 = vmatmul.mubr.bf16.gmra.mrb[0].mxu0 %v483
  %v1060 = vpop.f32.mrb[0].mxu0
  %v1061 = vadd.f32 0.0, %v1060
  %v1062 = vpop.f32.mrb[0].mxu0
  %v1063 = vadd.f32 0.0, %v1062
  %v1064 = vpop.f32.mrb[0].mxu0
  %v1065 = vadd.f32 0.0, %v1064
  %v1066 = vpop.f32.mrb[0].mxu0
  %v1067 = vadd.f32 0.0, %v1066
  %1068 = vmatprep.mubr.bf16.mxu0 %v747
  %1069 = vmatmul.mubr.bf16.gmra.mrb[0].mxu0 %v485
  %v1070 = vpop.f32.mrb[0].mxu0
  %v1071 = vadd.f32 0.0, %v1070
  %v1072 = vpop.f32.mrb[0].mxu0
  %v1073 = vadd.f32 0.0, %v1072
  %v1074 = vpop.f32.mrb[0].mxu0
  %v1075 = vadd.f32 0.0, %v1074
  %v1076 = vpop.f32.mrb[0].mxu0
  %v1077 = vadd.f32 0.0, %v1076
  %1078 = vmatprep.mubr.bf16.mxu0 %v750
  %1079 = vmatmul.mubr.bf16.gmra.mrb[0].mxu0 %v487
  %v1080 = vpop.f32.mrb[0].mxu0
  %v1081 = vadd.f32 0.0, %v1080
  %v1082 = vpop.f32.mrb[0].mxu0
  %v1083 = vadd.f32 0.0, %v1082
  %v1084 = vpop.f32.mrb[0].mxu0
  %v1085 = vadd.f32 0.0, %v1084
  %v1086 = vpop.f32.mrb[0].mxu0
  %v1087 = vadd.f32 0.0, %v1086
  %1088 = vmatprep.mubr.bf16.mxu0 %v753
  %1089 = vmatmul.mubr.bf16.gmra.mrb[0].mxu0 %v489
  %v1090 = vpop.f32.mrb[0].mxu0
  %v1091 = vadd.f32 0.0, %v1090
  %v1092 = vpop.f32.mrb[0].mxu0
  %v1093 = vadd.f32 0.0, %v1092
  %v1094 = vpop.f32.mrb[0].mxu0
  %v1095 = vadd.f32 0.0, %v1094
  %v1096 = vpop.f32.mrb[0].mxu0
  %v1097 = vadd.f32 0.0, %v1096
  %1098 = vmatprep.mubr.bf16.mxu0 %v756
  %1099 = vmatmul.mubr.bf16.gmra.mrb[0].mxu0 %v491
  %v1100 = vpop.f32.mrb[0].mxu0
  %v1101 = vadd.f32 0.0, %v1100
  %v1102 = vpop.f32.mrb[0].mxu0
  %v1103 = vadd.f32 0.0, %v1102
  %v1104 = vpop.f32.mrb[0].mxu0
  %v1105 = vadd.f32 0.0, %v1104
  %v1106 = vpop.f32.mrb[0].mxu0
  %v1107 = vadd.f32 0.0, %v1106
  %1108 = vmatprep.mubr.bf16.mxu0 %v759
  %1109 = vmatmul.mubr.bf16.gmra.mrb[0].mxu0 %v493
  %v1110 = vpop.f32.mrb[0].mxu0
  %v1111 = vadd.f32 0.0, %v1110
  %v1112 = vpop.f32.mrb[0].mxu0
  %v1113 = vadd.f32 0.0, %v1112
  %v1114 = vpop.f32.mrb[0].mxu0
  %v1115 = vadd.f32 0.0, %v1114
  %v1116 = vpop.f32.mrb[0].mxu0
  %v1117 = vadd.f32 0.0, %v1116
  %1118 = vmatprep.mubr.bf16.mxu0 %v762
  %1119 = vmatmul.mubr.bf16.gmra.mrb[0].mxu0 %v495
  %v1120 = vpop.f32.mrb[0].mxu0
  %v1121 = vadd.f32 0.0, %v1120
  %v1122 = vpop.f32.mrb[0].mxu0
  %v1123 = vadd.f32 0.0, %v1122
  %v1124 = vpop.f32.mrb[0].mxu0
  %v1125 = vadd.f32 0.0, %v1124
  %v1126 = vpop.f32.mrb[0].mxu0
  %v1127 = vadd.f32 0.0, %v1126
  %1128 = vmatprep.mubr.bf16.mxu0 %v765
  %1129 = vmatmul.mubr.bf16.gmra.mrb[0].mxu0 %v497
  %v1130 = vpop.f32.mrb[0].mxu0
  %v1131 = vadd.f32 0.0, %v1130
  %v1132 = vpop.f32.mrb[0].mxu0
  %v1133 = vadd.f32 0.0, %v1132
  %v1134 = vpop.f32.mrb[0].mxu0
  %v1135 = vadd.f32 0.0, %v1134
  %v1136 = vpop.f32.mrb[0].mxu0
  %v1137 = vadd.f32 0.0, %v1136
  %1138 = vmatprep.mubr.bf16.mxu0 %v768
  %1139 = vmatmul.mubr.bf16.gmra.mrb[0].mxu0 %v499
  %v1140 = vpop.f32.mrb[0].mxu0
  %v1141 = vadd.f32 0.0, %v1140
  %v1142 = vpop.f32.mrb[0].mxu0
  %v1143 = vadd.f32 0.0, %v1142
  %v1144 = vpop.f32.mrb[0].mxu0
  %v1145 = vadd.f32 0.0, %v1144
  %v1146 = vpop.f32.mrb[0].mxu0
  %v1147 = vadd.f32 0.0, %v1146
  %1148 = vmatprep.mubr.bf16.mxu0 %v771
  %1149 = vmatmul.mubr.bf16.gmra.mrb[0].mxu0 %v501
  %v1150 = vpop.f32.mrb[0].mxu0
  %v1151 = vadd.f32 0.0, %v1150
  %v1152 = vpop.f32.mrb[0].mxu0
  %v1153 = vadd.f32 0.0, %v1152
  %v1154 = vpop.f32.mrb[0].mxu0
  %v1155 = vadd.f32 0.0, %v1154
  %v1156 = vpop.f32.mrb[0].mxu0
  %v1157 = vadd.f32 0.0, %v1156
  %1158 = vmatprep.mubr.bf16.mxu0 %v774
  %1159 = vmatmul.mubr.bf16.gmra.mrb[0].mxu0 %v503
  %v1160 = vpop.f32.mrb[0].mxu0
  %v1161 = vadd.f32 0.0, %v1160
  %v1162 = vpop.f32.mrb[0].mxu0
  %v1163 = vadd.f32 0.0, %v1162
  %v1164 = vpop.f32.mrb[0].mxu0
  %v1165 = vadd.f32 0.0, %v1164
  %v1166 = vpop.f32.mrb[0].mxu0
  %v1167 = vadd.f32 0.0, %v1166
  %1168 = vmatprep.mubr.bf16.mxu0 %v777
  %1169 = vmatmul.mubr.bf16.gmra.mrb[0].mxu0 %v505
  %v1170 = vpop.f32.mrb[0].mxu0
  %v1171 = vadd.f32 0.0, %v1170
  %v1172 = vpop.f32.mrb[0].mxu0
  %v1173 = vadd.f32 0.0, %v1172
  %v1174 = vpop.f32.mrb[0].mxu0
  %v1175 = vadd.f32 0.0, %v1174
  %v1176 = vpop.f32.mrb[0].mxu0
  %v1177 = vadd.f32 0.0, %v1176
  %1178 = vmatprep.mubr.bf16.mxu0 %v780
  %1179 = vmatmul.mubr.bf16.gmra.mrb[0].mxu0 %v507
  %v1180 = vpop.f32.mrb[0].mxu0
  %v1181 = vadd.f32 0.0, %v1180
  %v1182 = vpop.f32.mrb[0].mxu0
  %v1183 = vadd.f32 0.0, %v1182
  %v1184 = vpop.f32.mrb[0].mxu0
  %v1185 = vadd.f32 0.0, %v1184
  %v1186 = vpop.f32.mrb[0].mxu0
  %v1187 = vadd.f32 0.0, %v1186
  %1188 = vmatprep.mubr.bf16.mxu0 %v783
  %1189 = vmatmul.mubr.bf16.gmra.mrb[0].mxu0 %v509
  %v1190 = vpop.f32.mrb[0].mxu0
  %v1191 = vadd.f32 0.0, %v1190
  %v1192 = vpop.f32.mrb[0].mxu0
  %v1193 = vadd.f32 0.0, %v1192
  %v1194 = vpop.f32.mrb[0].mxu0
  %v1195 = vadd.f32 0.0, %v1194
  %v1196 = vpop.f32.mrb[0].mxu0
  %v1197 = vadd.f32 0.0, %v1196
  %1198 = vmatprep.mubr.bf16.mxu0 %v786
  %1199 = vmatmul.mubr.bf16.gmra.mrb[0].mxu0 %v511
  %v1200 = vpop.f32.mrb[0].mxu0
  %v1201 = vadd.f32 0.0, %v1200
  %v1202 = vpop.f32.mrb[0].mxu0
  %v1203 = vadd.f32 0.0, %v1202
  %v1204 = vpop.f32.mrb[0].mxu0
  %v1205 = vadd.f32 0.0, %v1204
  %v1206 = vpop.f32.mrb[0].mxu0
  %v1207 = vadd.f32 0.0, %v1206
  %1208 = vmatprep.mubr.bf16.mxu0 %v789
  %1209 = vmatmul.mubr.bf16.gmra.mrb[0].mxu0 %v513
  %v1210 = vpop.f32.mrb[0].mxu0
  %v1211 = vadd.f32 0.0, %v1210
  %v1212 = vpop.f32.mrb[0].mxu0
  %v1213 = vadd.f32 0.0, %v1212
  %v1214 = vpop.f32.mrb[0].mxu0
  %v1215 = vadd.f32 0.0, %v1214
  %v1216 = vpop.f32.mrb[0].mxu0
  %v1217 = vadd.f32 0.0, %v1216
  %1218 = vmatprep.mubr.bf16.mxu0 %v792
  %1219 = vmatmul.mubr.bf16.gmra.mrb[0].mxu0 %v515
  %v1220 = vpop.f32.mrb[0].mxu0
  %v1221 = vadd.f32 0.0, %v1220
  %v1222 = vpop.f32.mrb[0].mxu0
  %v1223 = vadd.f32 0.0, %v1222
  %v1224 = vpop.f32.mrb[0].mxu0
  %v1225 = vadd.f32 0.0, %v1224
  %v1226 = vpop.f32.mrb[0].mxu0
  %v1227 = vadd.f32 0.0, %v1226
  %1228 = vmatprep.mubr.bf16.mxu0 %v795
  %1229 = vmatmul.mubr.bf16.gmra.mrb[0].mxu0 %v517
  %v1230 = vpop.f32.mrb[0].mxu0
  %v1231 = vadd.f32 0.0, %v1230
  %v1232 = vpop.f32.mrb[0].mxu0
  %v1233 = vadd.f32 0.0, %v1232
  %v1234 = vpop.f32.mrb[0].mxu0
  %v1235 = vadd.f32 0.0, %v1234
  %v1236 = vpop.f32.mrb[0].mxu0
  %v1237 = vadd.f32 0.0, %v1236
  %1238 = vmatprep.mubr.bf16.mxu0 %v798
  %1239 = vmatmul.mubr.bf16.gmra.mrb[0].mxu0 %v519
  %v1240 = vpop.f32.mrb[0].mxu0
  %v1241 = vadd.f32 0.0, %v1240
  %v1242 = vpop.f32.mrb[0].mxu0
  %v1243 = vadd.f32 0.0, %v1242
  %v1244 = vpop.f32.mrb[0].mxu0
  %v1245 = vadd.f32 0.0, %v1244
  %v1246 = vpop.f32.mrb[0].mxu0
  %v1247 = vadd.f32 0.0, %v1246
  %1248 = vmatprep.mubr.bf16.mxu0 %v801
  %1249 = vmatmul.mubr.bf16.gmra.mrb[0].mxu0 %v521
  %v1250 = vpop.f32.mrb[0].mxu0
  %v1251 = vadd.f32 0.0, %v1250
  %v1252 = vpop.f32.mrb[0].mxu0
  %v1253 = vadd.f32 0.0, %v1252
  %v1254 = vpop.f32.mrb[0].mxu0
  %v1255 = vadd.f32 0.0, %v1254
  %v1256 = vpop.f32.mrb[0].mxu0
  %v1257 = vadd.f32 0.0, %v1256
  %1258 = vmatprep.mubr.bf16.mxu0 %v804
  %1259 = vmatmul.mubr.bf16.gmra.mrb[0].mxu0 %v523
  %v1260 = vpop.f32.mrb[0].mxu0
  %v1261 = vadd.f32 0.0, %v1260
  %v1262 = vpop.f32.mrb[0].mxu0
  %v1263 = vadd.f32 0.0, %v1262
  %v1264 = vpop.f32.mrb[0].mxu0
  %v1265 = vadd.f32 0.0, %v1264
  %v1266 = vpop.f32.mrb[0].mxu0
  %v1267 = vadd.f32 0.0, %v1266
  %1268 = vmatprep.mubr.bf16.mxu0 %v807
  %1269 = vmatmul.mubr.bf16.gmra.mrb[0].mxu0 %v525
  %v1270 = vpop.f32.mrb[0].mxu0
  %v1271 = vadd.f32 0.0, %v1270
  %v1272 = vpop.f32.mrb[0].mxu0
  %v1273 = vadd.f32 0.0, %v1272
  %v1274 = vpop.f32.mrb[0].mxu0
  %v1275 = vadd.f32 0.0, %v1274
  %v1276 = vpop.f32.mrb[0].mxu0
  %v1277 = vadd.f32 0.0, %v1276
  %1278 = vmatprep.mubr.bf16.mxu0 %v810
  %1279 = vmatmul.mubr.bf16.gmra.mrb[0].mxu0 %v527
  %v1280 = vpop.f32.mrb[0].mxu0
  %v1281 = vadd.f32 0.0, %v1280
  %v1282 = vpop.f32.mrb[0].mxu0
  %v1283 = vadd.f32 0.0, %v1282
  %v1284 = vpop.f32.mrb[0].mxu0
  %v1285 = vadd.f32 0.0, %v1284
  %v1286 = vpop.f32.mrb[0].mxu0
  %v1287 = vadd.f32 0.0, %v1286
  %1288 = vmatprep.mubr.bf16.mxu0 %v813
  %1289 = vmatmul.mubr.bf16.gmra.mrb[0].mxu0 %v529
  %v1290 = vpop.f32.mrb[0].mxu0
  %v1291 = vadd.f32 0.0, %v1290
  %v1292 = vpop.f32.mrb[0].mxu0
  %v1293 = vadd.f32 0.0, %v1292
  %v1294 = vpop.f32.mrb[0].mxu0
  %v1295 = vadd.f32 0.0, %v1294
  %v1296 = vpop.f32.mrb[0].mxu0
  %v1297 = vadd.f32 0.0, %v1296
  %1298 = vmatprep.mubr.bf16.mxu0 %v816
  %1299 = vmatmul.mubr.bf16.gmra.mrb[0].mxu0 %v531
  %v1300 = vpop.f32.mrb[0].mxu0
  %v1301 = vadd.f32 0.0, %v1300
  %v1302 = vpop.f32.mrb[0].mxu0
  %v1303 = vadd.f32 0.0, %v1302
  %v1304 = vpop.f32.mrb[0].mxu0
  %v1305 = vadd.f32 0.0, %v1304
  %v1306 = vpop.f32.mrb[0].mxu0
  %v1307 = vadd.f32 0.0, %v1306
  %1308 = vmatprep.mubr.bf16.mxu0 %v819
  %1309 = vmatmul.mubr.bf16.gmra.mrb[0].mxu0 %v533
  %v1310 = vpop.f32.mrb[0].mxu0
  %v1311 = vadd.f32 0.0, %v1310
  %v1312 = vpop.f32.mrb[0].mxu0
  %v1313 = vadd.f32 0.0, %v1312
  %v1314 = vpop.f32.mrb[0].mxu0
  %v1315 = vadd.f32 0.0, %v1314
  %v1316 = vpop.f32.mrb[0].mxu0
  %v1317 = vadd.f32 0.0, %v1316
  %1318 = vmatprep.mubr.bf16.mxu0 %v822
  %1319 = vmatmul.mubr.bf16.gmra.mrb[0].mxu0 %v535
  %v1320 = vpop.f32.mrb[0].mxu0
  %v1321 = vadd.f32 0.0, %v1320
  %v1322 = vpop.f32.mrb[0].mxu0
  %v1323 = vadd.f32 0.0, %v1322
  %v1324 = vpop.f32.mrb[0].mxu0
  %v1325 = vadd.f32 0.0, %v1324
  %v1326 = vpop.f32.mrb[0].mxu0
  %v1327 = vadd.f32 0.0, %v1326
  %1328 = vmatprep.mubr.bf16.mxu0 %v825
  %1329 = vmatmul.mubr.bf16.gmra.mrb[0].mxu0 %v537
  %v1330 = vpop.f32.mrb[0].mxu0
  %v1331 = vadd.f32 0.0, %v1330
  %v1332 = vpop.f32.mrb[0].mxu0
  %v1333 = vadd.f32 0.0, %v1332
  %v1334 = vpop.f32.mrb[0].mxu0
  %v1335 = vadd.f32 0.0, %v1334
  %v1336 = vpop.f32.mrb[0].mxu0
  %v1337 = vadd.f32 0.0, %v1336
  %1338 = vmatprep.mubr.bf16.mxu0 %v828
  %1339 = vmatmul.mubr.bf16.gmra.mrb[0].mxu0 %v539
  %v1340 = vpop.f32.mrb[0].mxu0
  %v1341 = vadd.f32 0.0, %v1340
  %v1342 = vpop.f32.mrb[0].mxu0
  %v1343 = vadd.f32 0.0, %v1342
  %v1344 = vpop.f32.mrb[0].mxu0
  %v1345 = vadd.f32 0.0, %v1344
  %v1346 = vpop.f32.mrb[0].mxu0
  %v1347 = vadd.f32 0.0, %v1346
  %1348 = vmatprep.mubr.bf16.mxu0 %v831
  %1349 = vmatmul.mubr.bf16.gmra.mrb[0].mxu0 %v541
  %v1350 = vpop.f32.mrb[0].mxu0
  %v1351 = vadd.f32 0.0, %v1350
  %v1352 = vpop.f32.mrb[0].mxu0
  %v1353 = vadd.f32 0.0, %v1352
  %v1354 = vpop.f32.mrb[0].mxu0
  %v1355 = vadd.f32 0.0, %v1354
  %v1356 = vpop.f32.mrb[0].mxu0
  %v1357 = vadd.f32 0.0, %v1356
  %1358 = vmatprep.mubr.bf16.mxu0 %v834
  %1359 = vmatmul.mubr.bf16.gmra.mrb[0].mxu0 %v543
  %v1360 = vpop.f32.mrb[0].mxu0
  %v1361 = vadd.f32 0.0, %v1360
  %v1362 = vpop.f32.mrb[0].mxu0
  %v1363 = vadd.f32 0.0, %v1362
  %v1364 = vpop.f32.mrb[0].mxu0
  %v1365 = vadd.f32 0.0, %v1364
  %v1366 = vpop.f32.mrb[0].mxu0
  %v1367 = vadd.f32 0.0, %v1366
  %1368 = vdwg.mxu0
  %v1369 = vmax.f32 %v871, %v873
  %v1370 = vmax.f32 %v875, %v877
  %v1371 = vmax.f32 %v881, %v883
  %v1372 = vmax.f32 %v885, %v887
  %v1373 = vmax.f32 %v891, %v893
  %v1374 = vmax.f32 %v895, %v897
  %v1375 = vmax.f32 %v901, %v903
  %v1376 = vmax.f32 %v905, %v907
  %v1377 = vmax.f32 %v911, %v913
  %v1378 = vmax.f32 %v915, %v917
  %v1379 = vmax.f32 %v921, %v923
  %v1380 = vmax.f32 %v925, %v927
  %v1381 = vmax.f32 %v931, %v933
  %v1382 = vmax.f32 %v935, %v937
  %v1383 = vmax.f32 %v941, %v943
  %v1384 = vmax.f32 %v945, %v947
  %v1385 = vmax.f32 %v951, %v953
  %v1386 = vmax.f32 %v955, %v957
  %v1387 = vmax.f32 %v961, %v963
  %v1388 = vmax.f32 %v965, %v967
  %v1389 = vmax.f32 %v971, %v973
  %v1390 = vmax.f32 %v975, %v977
  %v1391 = vmax.f32 %v981, %v983
  %v1392 = vmax.f32 %v985, %v987
  %v1393 = vmax.f32 %v991, %v993
  %v1394 = vmax.f32 %v995, %v997
  %v1395 = vmax.f32 %v1001, %v1003
  %v1396 = vmax.f32 %v1005, %v1007
  %v1397 = vmax.f32 %v1011, %v1013
  %v1398 = vmax.f32 %v1015, %v1017
  %v1399 = vmax.f32 %v1021, %v1023
  %v1400 = vmax.f32 %v1025, %v1027
  %v1401 = vmax.f32 %v1031, %v1033
  %v1402 = vmax.f32 %v1035, %v1037
  %v1403 = vmax.f32 %v1041, %v1043
  %v1404 = vmax.f32 %v1045, %v1047
  %v1405 = vmax.f32 %v1051, %v1053
  %v1406 = vmax.f32 %v1055, %v1057
  %v1407 = vmax.f32 %v1061, %v1063
  %v1408 = vmax.f32 %v1065, %v1067
  %v1409 = vmax.f32 %v1071, %v1073
  %v1410 = vmax.f32 %v1075, %v1077
  %v1411 = vmax.f32 %v1081, %v1083
  %v1412 = vmax.f32 %v1085, %v1087
  %v1413 = vmax.f32 %v1091, %v1093
  %v1414 = vmax.f32 %v1095, %v1097
  %v1415 = vmax.f32 %v1101, %v1103
  %v1416 = vmax.f32 %v1105, %v1107
  %v1417 = vmax.f32 %v1111, %v1113
  %v1418 = vmax.f32 %v1115, %v1117
  %v1419 = vmax.f32 %v1121, %v1123
  %v1420 = vmax.f32 %v1125, %v1127
  %v1421 = vmax.f32 %v1131, %v1133
  %v1422 = vmax.f32 %v1135, %v1137
  %v1423 = vmax.f32 %v1141, %v1143
  %v1424 = vmax.f32 %v1145, %v1147
  %v1425 = vmax.f32 %v1151, %v1153
  %v1426 = vmax.f32 %v1155, %v1157
  %v1427 = vmax.f32 %v1161, %v1163
  %v1428 = vmax.f32 %v1165, %v1167
  %v1429 = vmax.f32 %v1171, %v1173
  %v1430 = vmax.f32 %v1175, %v1177
  %v1431 = vmax.f32 %v1181, %v1183
  %v1432 = vmax.f32 %v1185, %v1187
  %v1433 = vmax.f32 %v1191, %v1193
  %v1434 = vmax.f32 %v1195, %v1197
  %v1435 = vmax.f32 %v1201, %v1203
  %v1436 = vmax.f32 %v1205, %v1207
  %v1437 = vmax.f32 %v1211, %v1213
  %v1438 = vmax.f32 %v1215, %v1217
  %v1439 = vmax.f32 %v1221, %v1223
  %v1440 = vmax.f32 %v1225, %v1227
  %v1441 = vmax.f32 %v1231, %v1233
  %v1442 = vmax.f32 %v1235, %v1237
  %v1443 = vmax.f32 %v1241, %v1243
  %v1444 = vmax.f32 %v1245, %v1247
  %v1445 = vmax.f32 %v1251, %v1253
  %v1446 = vmax.f32 %v1255, %v1257
  %v1447 = vmax.f32 %v1261, %v1263
  %v1448 = vmax.f32 %v1265, %v1267
  %v1449 = vmax.f32 %v1271, %v1273
  %v1450 = vmax.f32 %v1275, %v1277
  %v1451 = vmax.f32 %v1281, %v1283
  %v1452 = vmax.f32 %v1285, %v1287
  %v1453 = vmax.f32 %v1291, %v1293
  %v1454 = vmax.f32 %v1295, %v1297
  %v1455 = vmax.f32 %v1301, %v1303
  %v1456 = vmax.f32 %v1305, %v1307
  %v1457 = vmax.f32 %v1311, %v1313
  %v1458 = vmax.f32 %v1315, %v1317
  %v1459 = vmax.f32 %v1321, %v1323
  %v1460 = vmax.f32 %v1325, %v1327
  %v1461 = vmax.f32 %v1331, %v1333
  %v1462 = vmax.f32 %v1335, %v1337
  %v1463 = vmax.f32 %v1341, %v1343
  %v1464 = vmax.f32 %v1345, %v1347
  %v1465 = vmax.f32 %v1351, %v1353
  %v1466 = vmax.f32 %v1355, %v1357
  %v1467 = vmax.f32 %v1361, %v1363
  %v1468 = vmax.f32 %v1365, %v1367
  %1569 = vrot.lane.b32.xlu0 %v1369, 64
  %v1570 = vpop.permute.xlu0 %1569
  %1571 = vrot.lane.b32.xlu0 %v1370, 64
  %v1572 = vpop.permute.xlu0 %1571
  %1573 = vrot.lane.b32.xlu0 %v1371, 64
  %v1574 = vpop.permute.xlu0 %1573
  %1575 = vrot.lane.b32.xlu0 %v1372, 64
  %v1576 = vpop.permute.xlu0 %1575
  %1577 = vrot.lane.b32.xlu0 %v1373, 64
  %v1578 = vpop.permute.xlu0 %1577
  %1579 = vrot.lane.b32.xlu0 %v1374, 64
  %v1580 = vpop.permute.xlu0 %1579
  %1581 = vrot.lane.b32.xlu0 %v1375, 64
  %v1582 = vpop.permute.xlu0 %1581
  %1583 = vrot.lane.b32.xlu0 %v1376, 64
  %v1584 = vpop.permute.xlu0 %1583
  %1585 = vrot.lane.b32.xlu0 %v1377, 64
  %v1586 = vpop.permute.xlu0 %1585
  %1587 = vrot.lane.b32.xlu0 %v1378, 64
  %v1588 = vpop.permute.xlu0 %1587
  %1589 = vrot.lane.b32.xlu0 %v1379, 64
  %v1590 = vpop.permute.xlu0 %1589
  %1591 = vrot.lane.b32.xlu0 %v1380, 64
  %v1592 = vpop.permute.xlu0 %1591
  %1593 = vrot.lane.b32.xlu0 %v1381, 64
  %v1594 = vpop.permute.xlu0 %1593
  %1595 = vrot.lane.b32.xlu0 %v1382, 64
  %v1596 = vpop.permute.xlu0 %1595
  %1597 = vrot.lane.b32.xlu0 %v1383, 64
  %v1598 = vpop.permute.xlu0 %1597
  %1599 = vrot.lane.b32.xlu0 %v1384, 64
  %v1600 = vpop.permute.xlu0 %1599
  %1601 = vrot.lane.b32.xlu0 %v1385, 64
  %v1602 = vpop.permute.xlu0 %1601
  %1603 = vrot.lane.b32.xlu0 %v1386, 64
  %v1604 = vpop.permute.xlu0 %1603
  %1605 = vrot.lane.b32.xlu0 %v1387, 64
  %v1606 = vpop.permute.xlu0 %1605
  %1607 = vrot.lane.b32.xlu0 %v1388, 64
  %v1608 = vpop.permute.xlu0 %1607
  %1609 = vrot.lane.b32.xlu0 %v1389, 64
  %v1610 = vpop.permute.xlu0 %1609
  %1611 = vrot.lane.b32.xlu0 %v1390, 64
  %v1612 = vpop.permute.xlu0 %1611
  %1613 = vrot.lane.b32.xlu0 %v1391, 64
  %v1614 = vpop.permute.xlu0 %1613
  %1615 = vrot.lane.b32.xlu0 %v1392, 64
  %v1616 = vpop.permute.xlu0 %1615
  %1617 = vrot.lane.b32.xlu0 %v1393, 64
  %v1618 = vpop.permute.xlu0 %1617
  %1619 = vrot.lane.b32.xlu0 %v1394, 64
  %v1620 = vpop.permute.xlu0 %1619
  %1621 = vrot.lane.b32.xlu0 %v1395, 64
  %v1622 = vpop.permute.xlu0 %1621
  %1623 = vrot.lane.b32.xlu0 %v1396, 64
  %v1624 = vpop.permute.xlu0 %1623
  %1625 = vrot.lane.b32.xlu0 %v1397, 64
  %v1626 = vpop.permute.xlu0 %1625
  %1627 = vrot.lane.b32.xlu0 %v1398, 64
  %v1628 = vpop.permute.xlu0 %1627
  %1629 = vrot.lane.b32.xlu0 %v1399, 64
  %v1630 = vpop.permute.xlu0 %1629
  %1631 = vrot.lane.b32.xlu0 %v1400, 64
  %v1632 = vpop.permute.xlu0 %1631
  %1633 = vrot.lane.b32.xlu0 %v1401, 64
  %v1634 = vpop.permute.xlu0 %1633
  %1635 = vrot.lane.b32.xlu0 %v1402, 64
  %v1636 = vpop.permute.xlu0 %1635
  %1637 = vrot.lane.b32.xlu0 %v1403, 64
  %v1638 = vpop.permute.xlu0 %1637
  %1639 = vrot.lane.b32.xlu0 %v1404, 64
  %v1640 = vpop.permute.xlu0 %1639
  %1641 = vrot.lane.b32.xlu0 %v1405, 64
  %v1642 = vpop.permute.xlu0 %1641
  %1643 = vrot.lane.b32.xlu0 %v1406, 64
  %v1644 = vpop.permute.xlu0 %1643
  %1645 = vrot.lane.b32.xlu0 %v1407, 64
  %v1646 = vpop.permute.xlu0 %1645
  %1647 = vrot.lane.b32.xlu0 %v1408, 64
  %v1648 = vpop.permute.xlu0 %1647
  %1649 = vrot.lane.b32.xlu0 %v1409, 64
  %v1650 = vpop.permute.xlu0 %1649
  %1651 = vrot.lane.b32.xlu0 %v1410, 64
  %v1652 = vpop.permute.xlu0 %1651
  %1653 = vrot.lane.b32.xlu0 %v1411, 64
  %v1654 = vpop.permute.xlu0 %1653
  %1655 = vrot.lane.b32.xlu0 %v1412, 64
  %v1656 = vpop.permute.xlu0 %1655
  %1657 = vrot.lane.b32.xlu0 %v1413, 64
  %v1658 = vpop.permute.xlu0 %1657
  %1659 = vrot.lane.b32.xlu0 %v1414, 64
  %v1660 = vpop.permute.xlu0 %1659
  %1661 = vrot.lane.b32.xlu0 %v1415, 64
  %v1662 = vpop.permute.xlu0 %1661
  %1663 = vrot.lane.b32.xlu0 %v1416, 64
  %v1664 = vpop.permute.xlu0 %1663
  %1665 = vrot.lane.b32.xlu0 %v1417, 64
  %v1666 = vpop.permute.xlu0 %1665
  %1667 = vrot.lane.b32.xlu0 %v1418, 64
  %v1668 = vpop.permute.xlu0 %1667
  %1669 = vrot.lane.b32.xlu0 %v1419, 64
  %v1670 = vpop.permute.xlu0 %1669
  %1671 = vrot.lane.b32.xlu0 %v1420, 64
  %v1672 = vpop.permute.xlu0 %1671
  %1673 = vrot.lane.b32.xlu0 %v1421, 64
  %v1674 = vpop.permute.xlu0 %1673
  %1675 = vrot.lane.b32.xlu0 %v1422, 64
  %v1676 = vpop.permute.xlu0 %1675
  %1677 = vrot.lane.b32.xlu0 %v1423, 64
  %v1678 = vpop.permute.xlu0 %1677
  %1679 = vrot.lane.b32.xlu0 %v1424, 64
  %v1680 = vpop.permute.xlu0 %1679
  %1681 = vrot.lane.b32.xlu0 %v1425, 64
  %v1682 = vpop.permute.xlu0 %1681
  %1683 = vrot.lane.b32.xlu0 %v1426, 64
  %v1684 = vpop.permute.xlu0 %1683
  %1685 = vrot.lane.b32.xlu0 %v1427, 64
  %v1686 = vpop.permute.xlu0 %1685
  %1687 = vrot.lane.b32.xlu0 %v1428, 64
  %v1688 = vpop.permute.xlu0 %1687
  %1689 = vrot.lane.b32.xlu0 %v1429, 64
  %v1690 = vpop.permute.xlu0 %1689
  %1691 = vrot.lane.b32.xlu0 %v1430, 64
  %v1692 = vpop.permute.xlu0 %1691
  %1693 = vrot.lane.b32.xlu0 %v1431, 64
  %v1694 = vpop.permute.xlu0 %1693
  %1695 = vrot.lane.b32.xlu0 %v1432, 64
  %v1696 = vpop.permute.xlu0 %1695
  %1697 = vrot.lane.b32.xlu0 %v1433, 64
  %v1698 = vpop.permute.xlu0 %1697
  %1699 = vrot.lane.b32.xlu0 %v1434, 64
  %v1700 = vpop.permute.xlu0 %1699
  %1701 = vrot.lane.b32.xlu0 %v1435, 64
  %v1702 = vpop.permute.xlu0 %1701
  %1703 = vrot.lane.b32.xlu0 %v1436, 64
  %v1704 = vpop.permute.xlu0 %1703
  %1705 = vrot.lane.b32.xlu0 %v1437, 64
  %v1706 = vpop.permute.xlu0 %1705
  %1707 = vrot.lane.b32.xlu0 %v1438, 64
  %v1708 = vpop.permute.xlu0 %1707
  %1709 = vrot.lane.b32.xlu0 %v1439, 64
  %v1710 = vpop.permute.xlu0 %1709
  %1711 = vrot.lane.b32.xlu0 %v1440, 64
  %v1712 = vpop.permute.xlu0 %1711
  %1713 = vrot.lane.b32.xlu0 %v1441, 64
  %v1714 = vpop.permute.xlu0 %1713
  %1715 = vrot.lane.b32.xlu0 %v1442, 64
  %v1716 = vpop.permute.xlu0 %1715
  %1717 = vrot.lane.b32.xlu0 %v1443, 64
  %v1718 = vpop.permute.xlu0 %1717
  %1719 = vrot.lane.b32.xlu0 %v1444, 64
  %v1720 = vpop.permute.xlu0 %1719
  %1721 = vrot.lane.b32.xlu0 %v1445, 64
  %v1722 = vpop.permute.xlu0 %1721
  %1723 = vrot.lane.b32.xlu0 %v1446, 64
  %v1724 = vpop.permute.xlu0 %1723
  %1725 = vrot.lane.b32.xlu0 %v1447, 64
  %v1726 = vpop.permute.xlu0 %1725
  %1727 = vrot.lane.b32.xlu0 %v1448, 64
  %v1728 = vpop.permute.xlu0 %1727
  %1729 = vrot.lane.b32.xlu0 %v1449, 64
  %v1730 = vpop.permute.xlu0 %1729
  %1731 = vrot.lane.b32.xlu0 %v1450, 64
  %v1732 = vpop.permute.xlu0 %1731
  %1733 = vrot.lane.b32.xlu0 %v1451, 64
  %v1734 = vpop.permute.xlu0 %1733
  %1735 = vrot.lane.b32.xlu0 %v1452, 64
  %v1736 = vpop.permute.xlu0 %1735
  %1737 = vrot.lane.b32.xlu0 %v1453, 64
  %v1738 = vpop.permute.xlu0 %1737
  %1739 = vrot.lane.b32.xlu0 %v1454, 64
  %v1740 = vpop.permute.xlu0 %1739
  %1741 = vrot.lane.b32.xlu0 %v1455, 64
  %v1742 = vpop.permute.xlu0 %1741
  %1743 = vrot.lane.b32.xlu0 %v1456, 64
  %v1744 = vpop.permute.xlu0 %1743
  %1745 = vrot.lane.b32.xlu0 %v1457, 64
  %v1746 = vpop.permute.xlu0 %1745
  %1747 = vrot.lane.b32.xlu0 %v1458, 64
  %v1748 = vpop.permute.xlu0 %1747
  %1749 = vrot.lane.b32.xlu0 %v1459, 64
  %v1750 = vpop.permute.xlu0 %1749
  %1751 = vrot.lane.b32.xlu0 %v1460, 64
  %v1752 = vpop.permute.xlu0 %1751
  %1753 = vrot.lane.b32.xlu0 %v1461, 64
  %v1754 = vpop.permute.xlu0 %1753
  %1755 = vrot.lane.b32.xlu0 %v1462, 64
  %v1756 = vpop.permute.xlu0 %1755
  %1757 = vrot.lane.b32.xlu0 %v1463, 64
  %v1758 = vpop.permute.xlu0 %1757
  %1759 = vrot.lane.b32.xlu0 %v1464, 64
  %v1760 = vpop.permute.xlu0 %1759
  %1761 = vrot.lane.b32.xlu0 %v1465, 64
  %v1762 = vpop.permute.xlu0 %1761
  %1763 = vrot.lane.b32.xlu0 %v1466, 64
  %v1764 = vpop.permute.xlu0 %1763
  %1765 = vrot.lane.b32.xlu0 %v1467, 64
  %v1766 = vpop.permute.xlu0 %1765
  %1767 = vrot.lane.b32.xlu0 %v1468, 64
  %v1768 = vpop.permute.xlu0 %1767
  %v1869 = vmax.f32 %v1369, %v1570
  %v1870 = vmax.f32 %v1370, %v1572
  %v1871 = vmax.f32 %v1371, %v1574
  %v1872 = vmax.f32 %v1372, %v1576
  %v1873 = vmax.f32 %v1373, %v1578
  %v1874 = vmax.f32 %v1374, %v1580
  %v1875 = vmax.f32 %v1375, %v1582
  %v1876 = vmax.f32 %v1376, %v1584
  %v1877 = vmax.f32 %v1377, %v1586
  %v1878 = vmax.f32 %v1378, %v1588
  %v1879 = vmax.f32 %v1379, %v1590
  %v1880 = vmax.f32 %v1380, %v1592
  %v1881 = vmax.f32 %v1381, %v1594
  %v1882 = vmax.f32 %v1382, %v1596
  %v1883 = vmax.f32 %v1383, %v1598
  %v1884 = vmax.f32 %v1384, %v1600
  %v1885 = vmax.f32 %v1385, %v1602
  %v1886 = vmax.f32 %v1386, %v1604
  %v1887 = vmax.f32 %v1387, %v1606
  %v1888 = vmax.f32 %v1388, %v1608
  %v1889 = vmax.f32 %v1389, %v1610
  %v1890 = vmax.f32 %v1390, %v1612
  %v1891 = vmax.f32 %v1391, %v1614
  %v1892 = vmax.f32 %v1392, %v1616
  %v1893 = vmax.f32 %v1393, %v1618
  %v1894 = vmax.f32 %v1394, %v1620
  %v1895 = vmax.f32 %v1395, %v1622
  %v1896 = vmax.f32 %v1396, %v1624
  %v1897 = vmax.f32 %v1397, %v1626
  %v1898 = vmax.f32 %v1398, %v1628
  %v1899 = vmax.f32 %v1399, %v1630
  %v1900 = vmax.f32 %v1400, %v1632
  %v1901 = vmax.f32 %v1401, %v1634
  %v1902 = vmax.f32 %v1402, %v1636
  %v1903 = vmax.f32 %v1403, %v1638
  %v1904 = vmax.f32 %v1404, %v1640
  %v1905 = vmax.f32 %v1405, %v1642
  %v1906 = vmax.f32 %v1406, %v1644
  %v1907 = vmax.f32 %v1407, %v1646
  %v1908 = vmax.f32 %v1408, %v1648
  %v1909 = vmax.f32 %v1409, %v1650
  %v1910 = vmax.f32 %v1410, %v1652
  %v1911 = vmax.f32 %v1411, %v1654
  %v1912 = vmax.f32 %v1412, %v1656
  %v1913 = vmax.f32 %v1413, %v1658
  %v1914 = vmax.f32 %v1414, %v1660
  %v1915 = vmax.f32 %v1415, %v1662
  %v1916 = vmax.f32 %v1416, %v1664
  %v1917 = vmax.f32 %v1417, %v1666
  %v1918 = vmax.f32 %v1418, %v1668
  %v1919 = vmax.f32 %v1419, %v1670
  %v1920 = vmax.f32 %v1420, %v1672
  %v1921 = vmax.f32 %v1421, %v1674
  %v1922 = vmax.f32 %v1422, %v1676
  %v1923 = vmax.f32 %v1423, %v1678
  %v1924 = vmax.f32 %v1424, %v1680
  %v1925 = vmax.f32 %v1425, %v1682
  %v1926 = vmax.f32 %v1426, %v1684
  %v1927 = vmax.f32 %v1427, %v1686
  %v1928 = vmax.f32 %v1428, %v1688
  %v1929 = vmax.f32 %v1429, %v1690
  %v1930 = vmax.f32 %v1430, %v1692
  %v1931 = vmax.f32 %v1431, %v1694
  %v1932 = vmax.f32 %v1432, %v1696
  %v1933 = vmax.f32 %v1433, %v1698
  %v1934 = vmax.f32 %v1434, %v1700
  %v1935 = vmax.f32 %v1435, %v1702
  %v1936 = vmax.f32 %v1436, %v1704
  %v1937 = vmax.f32 %v1437, %v1706
  %v1938 = vmax.f32 %v1438, %v1708
  %v1939 = vmax.f32 %v1439, %v1710
  %v1940 = vmax.f32 %v1440, %v1712
  %v1941 = vmax.f32 %v1441, %v1714
  %v1942 = vmax.f32 %v1442, %v1716
  %v1943 = vmax.f32 %v1443, %v1718
  %v1944 = vmax.f32 %v1444, %v1720
  %v1945 = vmax.f32 %v1445, %v1722
  %v1946 = vmax.f32 %v1446, %v1724
  %v1947 = vmax.f32 %v1447, %v1726
  %v1948 = vmax.f32 %v1448, %v1728
  %v1949 = vmax.f32 %v1449, %v1730
  %v1950 = vmax.f32 %v1450, %v1732
  %v1951 = vmax.f32 %v1451, %v1734
  %v1952 = vmax.f32 %v1452, %v1736
  %v1953 = vmax.f32 %v1453, %v1738
  %v1954 = vmax.f32 %v1454, %v1740
  %v1955 = vmax.f32 %v1455, %v1742
  %v1956 = vmax.f32 %v1456, %v1744
  %v1957 = vmax.f32 %v1457, %v1746
  %v1958 = vmax.f32 %v1458, %v1748
  %v1959 = vmax.f32 %v1459, %v1750
  %v1960 = vmax.f32 %v1460, %v1752
  %v1961 = vmax.f32 %v1461, %v1754
  %v1962 = vmax.f32 %v1462, %v1756
  %v1963 = vmax.f32 %v1463, %v1758
  %v1964 = vmax.f32 %v1464, %v1760
  %v1965 = vmax.f32 %v1465, %v1762
  %v1966 = vmax.f32 %v1466, %v1764
  %v1967 = vmax.f32 %v1467, %v1766
  %v1968 = vmax.f32 %v1468, %v1768
  %s1969 = scalar_lea.vmem %s0, 800
  %v1970 = vld [vmem:[%s1969] sm:$0xff]
  %v1971 = vld [vmem:[%s1969 + $0x8] sm:$0xff]
  %v1972 = vld [vmem:[%s1969 + $0x10] sm:$0xff]
  %v1973 = vld [vmem:[%s1969 + $0x18] sm:$0xff]
  %v1974 = vld [vmem:[%s1969 + $0x20] sm:$0xff]
  %v1975 = vld [vmem:[%s1969 + $0x28] sm:$0xff]
  %v1976 = vld [vmem:[%s1969 + $0x30] sm:$0xff]
  %v1977 = vld [vmem:[%s1969 + $0x38] sm:$0xff]
  %v1978 = vld [vmem:[%s1969 + $0x40] sm:$0xff]
  %v1979 = vld [vmem:[%s1969 + $0x48] sm:$0xff]
  %v1980 = vld [vmem:[%s1969 + $0x50] sm:$0xff]
  %v1981 = vld [vmem:[%s1969 + $0x58] sm:$0xff]
  %v1982 = vld [vmem:[%s1969 + $0x60] sm:$0xff]
  %v1983 = vld [vmem:[%s1969 + $0x68] sm:$0xff]
  %v1984 = vld [vmem:[%s1969 + $0x70] sm:$0xff]
  %v1985 = vld [vmem:[%s1969 + $0x78] sm:$0xff]
  %v1986 = vld [vmem:[%s1969 + $0x80] sm:$0xff]
  %v1987 = vld [vmem:[%s1969 + $0x88] sm:$0xff]
  %v1988 = vld [vmem:[%s1969 + $0x90] sm:$0xff]
  %v1989 = vld [vmem:[%s1969 + $0x98] sm:$0xff]
  %v1990 = vld [vmem:[%s1969 + $0xa0] sm:$0xff]
  %v1991 = vld [vmem:[%s1969 + $0xa8] sm:$0xff]
  %v1992 = vld [vmem:[%s1969 + $0xb0] sm:$0xff]
  %v1993 = vld [vmem:[%s1969 + $0xb8] sm:$0xff]
  %v1994 = vld [vmem:[%s1969 + $0xc0] sm:$0xff]
  %v1995 = vld [vmem:[%s1969 + $0xc8] sm:$0xff]
  %v1996 = vld [vmem:[%s1969 + $0xd0] sm:$0xff]
  %v1997 = vld [vmem:[%s1969 + $0xd8] sm:$0xff]
  %v1998 = vld [vmem:[%s1969 + $0xe0] sm:$0xff]
  %v1999 = vld [vmem:[%s1969 + $0xe8] sm:$0xff]
  %v2000 = vld [vmem:[%s1969 + $0xf0] sm:$0xff]
  %v2001 = vld [vmem:[%s1969 + $0xf8] sm:$0xff]
  %v2002 = vld [vmem:[%s1969 + $0x100] sm:$0xff]
  %v2003 = vld [vmem:[%s1969 + $0x108] sm:$0xff]
  %v2004 = vld [vmem:[%s1969 + $0x110] sm:$0xff]
  %v2005 = vld [vmem:[%s1969 + $0x118] sm:$0xff]
  %v2006 = vld [vmem:[%s1969 + $0x120] sm:$0xff]
  %v2007 = vld [vmem:[%s1969 + $0x128] sm:$0xff]
  %v2008 = vld [vmem:[%s1969 + $0x130] sm:$0xff]
  %v2009 = vld [vmem:[%s1969 + $0x138] sm:$0xff]
  %v2010 = vld [vmem:[%s1969 + $0x140] sm:$0xff]
  %v2011 = vld [vmem:[%s1969 + $0x148] sm:$0xff]
  %v2012 = vld [vmem:[%s1969 + $0x150] sm:$0xff]
  %v2013 = vld [vmem:[%s1969 + $0x158] sm:$0xff]
  %v2014 = vld [vmem:[%s1969 + $0x160] sm:$0xff]
  %v2015 = vld [vmem:[%s1969 + $0x168] sm:$0xff]
  %v2016 = vld [vmem:[%s1969 + $0x170] sm:$0xff]
  %v2017 = vld [vmem:[%s1969 + $0x178] sm:$0xff]
  %v2018 = vld [vmem:[%s1969 + $0x180] sm:$0xff]
  %v2019 = vld [vmem:[%s1969 + $0x188] sm:$0xff]
  %v2020 = vld [vmem:[%s1969 + $0x190] sm:$0xff]
  %v2021 = vld [vmem:[%s1969 + $0x198] sm:$0xff]
  %v2022 = vld [vmem:[%s1969 + $0x1a0] sm:$0xff]
  %v2023 = vld [vmem:[%s1969 + $0x1a8] sm:$0xff]
  %v2024 = vld [vmem:[%s1969 + $0x1b0] sm:$0xff]
  %v2025 = vld [vmem:[%s1969 + $0x1b8] sm:$0xff]
  %v2026 = vld [vmem:[%s1969 + $0x1c0] sm:$0xff]
  %v2027 = vld [vmem:[%s1969 + $0x1c8] sm:$0xff]
  %v2028 = vld [vmem:[%s1969 + $0x1d0] sm:$0xff]
  %v2029 = vld [vmem:[%s1969 + $0x1d8] sm:$0xff]
  %v2030 = vld [vmem:[%s1969 + $0x1e0] sm:$0xff]
  %v2031 = vld [vmem:[%s1969 + $0x1e8] sm:$0xff]
  %v2032 = vld [vmem:[%s1969 + $0x1f0] sm:$0xff]
  %v2033 = vld [vmem:[%s1969 + $0x1f8] sm:$0xff]
  %v2034 = vld [vmem:[%s1969 + $0x200] sm:$0xff]
  %v2035 = vld [vmem:[%s1969 + $0x208] sm:$0xff]
  %v2036 = vld [vmem:[%s1969 + $0x210] sm:$0xff]
  %v2037 = vld [vmem:[%s1969 + $0x218] sm:$0xff]
  %v2038 = vld [vmem:[%s1969 + $0x220] sm:$0xff]
  %v2039 = vld [vmem:[%s1969 + $0x228] sm:$0xff]
  %v2040 = vld [vmem:[%s1969 + $0x230] sm:$0xff]
  %v2041 = vld [vmem:[%s1969 + $0x238] sm:$0xff]
  %v2042 = vld [vmem:[%s1969 + $0x240] sm:$0xff]
  %v2043 = vld [vmem:[%s1969 + $0x248] sm:$0xff]
  %v2044 = vld [vmem:[%s1969 + $0x250] sm:$0xff]
  %v2045 = vld [vmem:[%s1969 + $0x258] sm:$0xff]
  %v2046 = vld [vmem:[%s1969 + $0x260] sm:$0xff]
  %v2047 = vld [vmem:[%s1969 + $0x268] sm:$0xff]
  %v2048 = vld [vmem:[%s1969 + $0x270] sm:$0xff]
  %v2049 = vld [vmem:[%s1969 + $0x278] sm:$0xff]
  %v2050 = vld [vmem:[%s1969 + $0x280] sm:$0xff]
  %v2051 = vld [vmem:[%s1969 + $0x288] sm:$0xff]
  %v2052 = vld [vmem:[%s1969 + $0x290] sm:$0xff]
  %v2053 = vld [vmem:[%s1969 + $0x298] sm:$0xff]
  %v2054 = vld [vmem:[%s1969 + $0x2a0] sm:$0xff]
  %v2055 = vld [vmem:[%s1969 + $0x2a8] sm:$0xff]
  %v2056 = vld [vmem:[%s1969 + $0x2b0] sm:$0xff]
  %v2057 = vld [vmem:[%s1969 + $0x2b8] sm:$0xff]
  %v2058 = vld [vmem:[%s1969 + $0x2c0] sm:$0xff]
  %v2059 = vld [vmem:[%s1969 + $0x2c8] sm:$0xff]
  %v2060 = vld [vmem:[%s1969 + $0x2d0] sm:$0xff]
  %v2061 = vld [vmem:[%s1969 + $0x2d8] sm:$0xff]
  %v2062 = vld [vmem:[%s1969 + $0x2e0] sm:$0xff]
  %v2063 = vld [vmem:[%s1969 + $0x2e8] sm:$0xff]
  %v2064 = vld [vmem:[%s1969 + $0x2f0] sm:$0xff]
  %v2065 = vld [vmem:[%s1969 + $0x2f8] sm:$0xff]
  %v2066 = vld [vmem:[%s1969 + $0x300] sm:$0xff]
  %v2067 = vld [vmem:[%s1969 + $0x308] sm:$0xff]
  %v2068 = vld [vmem:[%s1969 + $0x310] sm:$0xff]
  %v2069 = vld [vmem:[%s1969 + $0x318] sm:$0xff]
  %v2170 = vunpack.c.l.b16 %v1970
  %v2171 = vunpack.c.h.b16 %v1970
  %v2172 = vunpack.c.l.b16 %v1971
  %v2173 = vunpack.c.h.b16 %v1971
  %v2174 = vunpack.c.l.b16 %v1972
  %v2175 = vunpack.c.h.b16 %v1972
  %v2176 = vunpack.c.l.b16 %v1973
  %v2177 = vunpack.c.h.b16 %v1973
  %v2178 = vunpack.c.l.b16 %v1974
  %v2179 = vunpack.c.h.b16 %v1974
  %v2180 = vunpack.c.l.b16 %v1975
  %v2181 = vunpack.c.h.b16 %v1975
  %v2182 = vunpack.c.l.b16 %v1976
  %v2183 = vunpack.c.h.b16 %v1976
  %v2184 = vunpack.c.l.b16 %v1977
  %v2185 = vunpack.c.h.b16 %v1977
  %v2186 = vunpack.c.l.b16 %v1978
  %v2187 = vunpack.c.h.b16 %v1978
  %v2188 = vunpack.c.l.b16 %v1979
  %v2189 = vunpack.c.h.b16 %v1979
  %v2190 = vunpack.c.l.b16 %v1980
  %v2191 = vunpack.c.h.b16 %v1980
  %v2192 = vunpack.c.l.b16 %v1981
  %v2193 = vunpack.c.h.b16 %v1981
  %v2194 = vunpack.c.l.b16 %v1982
  %v2195 = vunpack.c.h.b16 %v1982
  %v2196 = vunpack.c.l.b16 %v1983
  %v2197 = vunpack.c.h.b16 %v1983
  %v2198 = vunpack.c.l.b16 %v1984
  %v2199 = vunpack.c.h.b16 %v1984
  %v2200 = vunpack.c.l.b16 %v1985
  %v2201 = vunpack.c.h.b16 %v1985
  %v2202 = vunpack.c.l.b16 %v1986
  %v2203 = vunpack.c.h.b16 %v1986
  %v2204 = vunpack.c.l.b16 %v1987
  %v2205 = vunpack.c.h.b16 %v1987
  %v2206 = vunpack.c.l.b16 %v1988
  %v2207 = vunpack.c.h.b16 %v1988
  %v2208 = vunpack.c.l.b16 %v1989
  %v2209 = vunpack.c.h.b16 %v1989
  %v2210 = vunpack.c.l.b16 %v1990
  %v2211 = vunpack.c.h.b16 %v1990
  %v2212 = vunpack.c.l.b16 %v1991
  %v2213 = vunpack.c.h.b16 %v1991
  %v2214 = vunpack.c.l.b16 %v1992
  %v2215 = vunpack.c.h.b16 %v1992
  %v2216 = vunpack.c.l.b16 %v1993
  %v2217 = vunpack.c.h.b16 %v1993
  %v2218 = vunpack.c.l.b16 %v1994
  %v2219 = vunpack.c.h.b16 %v1994
  %v2220 = vunpack.c.l.b16 %v1995
  %v2221 = vunpack.c.h.b16 %v1995
  %v2222 = vunpack.c.l.b16 %v1996
  %v2223 = vunpack.c.h.b16 %v1996
  %v2224 = vunpack.c.l.b16 %v1997
  %v2225 = vunpack.c.h.b16 %v1997
  %v2226 = vunpack.c.l.b16 %v1998
  %v2227 = vunpack.c.h.b16 %v1998
  %v2228 = vunpack.c.l.b16 %v1999
  %v2229 = vunpack.c.h.b16 %v1999
  %v2230 = vunpack.c.l.b16 %v2000
  %v2231 = vunpack.c.h.b16 %v2000
  %v2232 = vunpack.c.l.b16 %v2001
  %v2233 = vunpack.c.h.b16 %v2001
  %v2234 = vunpack.c.l.b16 %v2002
  %v2235 = vunpack.c.h.b16 %v2002
  %v2236 = vunpack.c.l.b16 %v2003
  %v2237 = vunpack.c.h.b16 %v2003
  %v2238 = vunpack.c.l.b16 %v2004
  %v2239 = vunpack.c.h.b16 %v2004
  %v2240 = vunpack.c.l.b16 %v2005
  %v2241 = vunpack.c.h.b16 %v2005
  %v2242 = vunpack.c.l.b16 %v2006
  %v2243 = vunpack.c.h.b16 %v2006
  %v2244 = vunpack.c.l.b16 %v2007
  %v2245 = vunpack.c.h.b16 %v2007
  %v2246 = vunpack.c.l.b16 %v2008
  %v2247 = vunpack.c.h.b16 %v2008
  %v2248 = vunpack.c.l.b16 %v2009
  %v2249 = vunpack.c.h.b16 %v2009
  %v2250 = vunpack.c.l.b16 %v2010
  %v2251 = vunpack.c.h.b16 %v2010
  %v2252 = vunpack.c.l.b16 %v2011
  %v2253 = vunpack.c.h.b16 %v2011
  %v2254 = vunpack.c.l.b16 %v2012
  %v2255 = vunpack.c.h.b16 %v2012
  %v2256 = vunpack.c.l.b16 %v2013
  %v2257 = vunpack.c.h.b16 %v2013
  %v2258 = vunpack.c.l.b16 %v2014
  %v2259 = vunpack.c.h.b16 %v2014
  %v2260 = vunpack.c.l.b16 %v2015
  %v2261 = vunpack.c.h.b16 %v2015
  %v2262 = vunpack.c.l.b16 %v2016
  %v2263 = vunpack.c.h.b16 %v2016
  %v2264 = vunpack.c.l.b16 %v2017
  %v2265 = vunpack.c.h.b16 %v2017
  %v2266 = vunpack.c.l.b16 %v2018
  %v2267 = vunpack.c.h.b16 %v2018
  %v2268 = vunpack.c.l.b16 %v2019
  %v2269 = vunpack.c.h.b16 %v2019
  %v2270 = vunpack.c.l.b16 %v2020
  %v2271 = vunpack.c.h.b16 %v2020
  %v2272 = vunpack.c.l.b16 %v2021
  %v2273 = vunpack.c.h.b16 %v2021
  %v2274 = vunpack.c.l.b16 %v2022
  %v2275 = vunpack.c.h.b16 %v2022
  %v2276 = vunpack.c.l.b16 %v2023
  %v2277 = vunpack.c.h.b16 %v2023
  %v2278 = vunpack.c.l.b16 %v2024
  %v2279 = vunpack.c.h.b16 %v2024
  %v2280 = vunpack.c.l.b16 %v2025
  %v2281 = vunpack.c.h.b16 %v2025
  %v2282 = vunpack.c.l.b16 %v2026
  %v2283 = vunpack.c.h.b16 %v2026
  %v2284 = vunpack.c.l.b16 %v2027
  %v2285 = vunpack.c.h.b16 %v2027
  %v2286 = vunpack.c.l.b16 %v2028
  %v2287 = vunpack.c.h.b16 %v2028
  %v2288 = vunpack.c.l.b16 %v2029
  %v2289 = vunpack.c.h.b16 %v2029
  %v2290 = vunpack.c.l.b16 %v2030
  %v2291 = vunpack.c.h.b16 %v2030
  %v2292 = vunpack.c.l.b16 %v2031
  %v2293 = vunpack.c.h.b16 %v2031
  %v2294 = vunpack.c.l.b16 %v2032
  %v2295 = vunpack.c.h.b16 %v2032
  %v2296 = vunpack.c.l.b16 %v2033
  %v2297 = vunpack.c.h.b16 %v2033
  %v2298 = vunpack.c.l.b16 %v2034
  %v2299 = vunpack.c.h.b16 %v2034
  %v2300 = vunpack.c.l.b16 %v2035
  %v2301 = vunpack.c.h.b16 %v2035
  %v2302 = vunpack.c.l.b16 %v2036
  %v2303 = vunpack.c.h.b16 %v2036
  %v2304 = vunpack.c.l.b16 %v2037
  %v2305 = vunpack.c.h.b16 %v2037
  %v2306 = vunpack.c.l.b16 %v2038
  %v2307 = vunpack.c.h.b16 %v2038
  %v2308 = vunpack.c.l.b16 %v2039
  %v2309 = vunpack.c.h.b16 %v2039
  %v2310 = vunpack.c.l.b16 %v2040
  %v2311 = vunpack.c.h.b16 %v2040
  %v2312 = vunpack.c.l.b16 %v2041
  %v2313 = vunpack.c.h.b16 %v2041
  %v2314 = vunpack.c.l.b16 %v2042
  %v2315 = vunpack.c.h.b16 %v2042
  %v2316 = vunpack.c.l.b16 %v2043
  %v2317 = vunpack.c.h.b16 %v2043
  %v2318 = vunpack.c.l.b16 %v2044
  %v2319 = vunpack.c.h.b16 %v2044
  %v2320 = vunpack.c.l.b16 %v2045
  %v2321 = vunpack.c.h.b16 %v2045
  %v2322 = vunpack.c.l.b16 %v2046
  %v2323 = vunpack.c.h.b16 %v2046
  %v2324 = vunpack.c.l.b16 %v2047
  %v2325 = vunpack.c.h.b16 %v2047
  %v2326 = vunpack.c.l.b16 %v2048
  %v2327 = vunpack.c.h.b16 %v2048
  %v2328 = vunpack.c.l.b16 %v2049
  %v2329 = vunpack.c.h.b16 %v2049
  %v2330 = vunpack.c.l.b16 %v2050
  %v2331 = vunpack.c.h.b16 %v2050
  %v2332 = vunpack.c.l.b16 %v2051
  %v2333 = vunpack.c.h.b16 %v2051
  %v2334 = vunpack.c.l.b16 %v2052
  %v2335 = vunpack.c.h.b16 %v2052
  %v2336 = vunpack.c.l.b16 %v2053
  %v2337 = vunpack.c.h.b16 %v2053
  %v2338 = vunpack.c.l.b16 %v2054
  %v2339 = vunpack.c.h.b16 %v2054
  %v2340 = vunpack.c.l.b16 %v2055
  %v2341 = vunpack.c.h.b16 %v2055
  %v2342 = vunpack.c.l.b16 %v2056
  %v2343 = vunpack.c.h.b16 %v2056
  %v2344 = vunpack.c.l.b16 %v2057
  %v2345 = vunpack.c.h.b16 %v2057
  %v2346 = vunpack.c.l.b16 %v2058
  %v2347 = vunpack.c.h.b16 %v2058
  %v2348 = vunpack.c.l.b16 %v2059
  %v2349 = vunpack.c.h.b16 %v2059
  %v2350 = vunpack.c.l.b16 %v2060
  %v2351 = vunpack.c.h.b16 %v2060
  %v2352 = vunpack.c.l.b16 %v2061
  %v2353 = vunpack.c.h.b16 %v2061
  %v2354 = vunpack.c.l.b16 %v2062
  %v2355 = vunpack.c.h.b16 %v2062
  %v2356 = vunpack.c.l.b16 %v2063
  %v2357 = vunpack.c.h.b16 %v2063
  %v2358 = vunpack.c.l.b16 %v2064
  %v2359 = vunpack.c.h.b16 %v2064
  %v2360 = vunpack.c.l.b16 %v2065
  %v2361 = vunpack.c.h.b16 %v2065
  %v2362 = vunpack.c.l.b16 %v2066
  %v2363 = vunpack.c.h.b16 %v2066
  %v2364 = vunpack.c.l.b16 %v2067
  %v2365 = vunpack.c.h.b16 %v2067
  %v2366 = vunpack.c.l.b16 %v2068
  %v2367 = vunpack.c.h.b16 %v2068
  %v2368 = vunpack.c.l.b16 %v2069
  %v2369 = vunpack.c.h.b16 %v2069
  %v2370 = vpack.c.b16 %v2172, %v2170
  %v2371 = vpack.c.b16 %v2173, %v2171
  %v2372 = vpack.c.b16 %v2176, %v2174
  %v2373 = vpack.c.b16 %v2177, %v2175
  %v2374 = vpack.c.b16 %v2180, %v2178
  %v2375 = vpack.c.b16 %v2181, %v2179
  %v2376 = vpack.c.b16 %v2184, %v2182
  %v2377 = vpack.c.b16 %v2185, %v2183
  %v2378 = vpack.c.b16 %v2188, %v2186
  %v2379 = vpack.c.b16 %v2189, %v2187
  %v2380 = vpack.c.b16 %v2192, %v2190
  %v2381 = vpack.c.b16 %v2193, %v2191
  %v2382 = vpack.c.b16 %v2196, %v2194
  %v2383 = vpack.c.b16 %v2197, %v2195
  %v2384 = vpack.c.b16 %v2200, %v2198
  %v2385 = vpack.c.b16 %v2201, %v2199
  %v2386 = vpack.c.b16 %v2204, %v2202
  %v2387 = vpack.c.b16 %v2205, %v2203
  %v2388 = vpack.c.b16 %v2208, %v2206
  %v2389 = vpack.c.b16 %v2209, %v2207
  %v2390 = vpack.c.b16 %v2212, %v2210
  %v2391 = vpack.c.b16 %v2213, %v2211
  %v2392 = vpack.c.b16 %v2216, %v2214
  %v2393 = vpack.c.b16 %v2217, %v2215
  %v2394 = vpack.c.b16 %v2220, %v2218
  %v2395 = vpack.c.b16 %v2221, %v2219
  %v2396 = vpack.c.b16 %v2224, %v2222
  %v2397 = vpack.c.b16 %v2225, %v2223
  %v2398 = vpack.c.b16 %v2228, %v2226
  %v2399 = vpack.c.b16 %v2229, %v2227
  %v2400 = vpack.c.b16 %v2232, %v2230
  %v2401 = vpack.c.b16 %v2233, %v2231
  %v2402 = vpack.c.b16 %v2236, %v2234
  %v2403 = vpack.c.b16 %v2237, %v2235
  %v2404 = vpack.c.b16 %v2240, %v2238
  %v2405 = vpack.c.b16 %v2241, %v2239
  %v2406 = vpack.c.b16 %v2244, %v2242
  %v2407 = vpack.c.b16 %v2245, %v2243
  %v2408 = vpack.c.b16 %v2248, %v2246
  %v2409 = vpack.c.b16 %v2249, %v2247
  %v2410 = vpack.c.b16 %v2252, %v2250
  %v2411 = vpack.c.b16 %v2253, %v2251
  %v2412 = vpack.c.b16 %v2256, %v2254
  %v2413 = vpack.c.b16 %v2257, %v2255
  %v2414 = vpack.c.b16 %v2260, %v2258
  %v2415 = vpack.c.b16 %v2261, %v2259
  %v2416 = vpack.c.b16 %v2264, %v2262
  %v2417 = vpack.c.b16 %v2265, %v2263
  %v2418 = vpack.c.b16 %v2268, %v2266
  %v2419 = vpack.c.b16 %v2269, %v2267
  %v2420 = vpack.c.b16 %v2272, %v2270
  %v2421 = vpack.c.b16 %v2273, %v2271
  %v2422 = vpack.c.b16 %v2276, %v2274
  %v2423 = vpack.c.b16 %v2277, %v2275
  %v2424 = vpack.c.b16 %v2280, %v2278
  %v2425 = vpack.c.b16 %v2281, %v2279
  %v2426 = vpack.c.b16 %v2284, %v2282
  %v2427 = vpack.c.b16 %v2285, %v2283
  %v2428 = vpack.c.b16 %v2288, %v2286
  %v2429 = vpack.c.b16 %v2289, %v2287
  %v2430 = vpack.c.b16 %v2292, %v2290
  %v2431 = vpack.c.b16 %v2293, %v2291
  %v2432 = vpack.c.b16 %v2296, %v2294
  %v2433 = vpack.c.b16 %v2297, %v2295
  %v2434 = vpack.c.b16 %v2300, %v2298
  %v2435 = vpack.c.b16 %v2301, %v2299
  %v2436 = vpack.c.b16 %v2304, %v2302
  %v2437 = vpack.c.b16 %v2305, %v2303
  %v2438 = vpack.c.b16 %v2308, %v2306
  %v2439 = vpack.c.b16 %v2309, %v2307
  %v2440 = vpack.c.b16 %v2312, %v2310
  %v2441 = vpack.c.b16 %v2313, %v2311
  %v2442 = vpack.c.b16 %v2316, %v2314
  %v2443 = vpack.c.b16 %v2317, %v2315
  %v2444 = vpack.c.b16 %v2320, %v2318
  %v2445 = vpack.c.b16 %v2321, %v2319
  %v2446 = vpack.c.b16 %v2324, %v2322
  %v2447 = vpack.c.b16 %v2325, %v2323
  %v2448 = vpack.c.b16 %v2328, %v2326
  %v2449 = vpack.c.b16 %v2329, %v2327
  %v2450 = vpack.c.b16 %v2332, %v2330
  %v2451 = vpack.c.b16 %v2333, %v2331
  %v2452 = vpack.c.b16 %v2336, %v2334
  %v2453 = vpack.c.b16 %v2337, %v2335
  %v2454 = vpack.c.b16 %v2340, %v2338
  %v2455 = vpack.c.b16 %v2341, %v2339
  %v2456 = vpack.c.b16 %v2344, %v2342
  %v2457 = vpack.c.b16 %v2345, %v2343
  %v2458 = vpack.c.b16 %v2348, %v2346
  %v2459 = vpack.c.b16 %v2349, %v2347
  %v2460 = vpack.c.b16 %v2352, %v2350
  %v2461 = vpack.c.b16 %v2353, %v2351
  %v2462 = vpack.c.b16 %v2356, %v2354
  %v2463 = vpack.c.b16 %v2357, %v2355
  %v2464 = vpack.c.b16 %v2360, %v2358
  %v2465 = vpack.c.b16 %v2361, %v2359
  %v2466 = vpack.c.b16 %v2364, %v2362
  %v2467 = vpack.c.b16 %v2365, %v2363
  %v2468 = vpack.c.b16 %v2368, %v2366
  %v2469 = vpack.c.b16 %v2369, %v2367
  %v2521 = vsel %vm685, %v2371, 0
  %v2524 = vsel %vm685, %v2373, 0
  %v2527 = vsel %vm685, %v2375, 0
  %v2530 = vsel %vm685, %v2377, 0
  %v2533 = vsel %vm685, %v2379, 0
  %v2536 = vsel %vm685, %v2381, 0
  %v2539 = vsel %vm685, %v2383, 0
  %v2542 = vsel %vm685, %v2385, 0
  %v2545 = vsel %vm685, %v2387, 0
  %v2548 = vsel %vm685, %v2389, 0
  %v2551 = vsel %vm685, %v2391, 0
  %v2554 = vsel %vm685, %v2393, 0
  %v2557 = vsel %vm685, %v2395, 0
  %v2560 = vsel %vm685, %v2397, 0
  %v2563 = vsel %vm685, %v2399, 0
  %v2566 = vsel %vm685, %v2401, 0
  %v2569 = vsel %vm685, %v2403, 0
  %v2572 = vsel %vm685, %v2405, 0
  %v2575 = vsel %vm685, %v2407, 0
  %v2578 = vsel %vm685, %v2409, 0
  %v2581 = vsel %vm685, %v2411, 0
  %v2584 = vsel %vm685, %v2413, 0
  %v2587 = vsel %vm685, %v2415, 0
  %v2590 = vsel %vm685, %v2417, 0
  %v2593 = vsel %vm685, %v2419, 0
  %v2596 = vsel %vm685, %v2421, 0
  %v2599 = vsel %vm685, %v2423, 0
  %v2602 = vsel %vm685, %v2425, 0
  %v2605 = vsel %vm685, %v2427, 0
  %v2608 = vsel %vm685, %v2429, 0
  %v2611 = vsel %vm685, %v2431, 0
  %v2614 = vsel %vm685, %v2433, 0
  %v2617 = vsel %vm685, %v2435, 0
  %v2620 = vsel %vm685, %v2437, 0
  %v2623 = vsel %vm685, %v2439, 0
  %v2626 = vsel %vm685, %v2441, 0
  %v2629 = vsel %vm685, %v2443, 0
  %v2632 = vsel %vm685, %v2445, 0
  %v2635 = vsel %vm685, %v2447, 0
  %v2638 = vsel %vm685, %v2449, 0
  %v2641 = vsel %vm685, %v2451, 0
  %v2644 = vsel %vm685, %v2453, 0
  %v2647 = vsel %vm685, %v2455, 0
  %v2650 = vsel %vm685, %v2457, 0
  %v2653 = vsel %vm685, %v2459, 0
  %v2656 = vsel %vm685, %v2461, 0
  %v2659 = vsel %vm685, %v2463, 0
  %v2662 = vsel %vm685, %v2465, 0
  %v2665 = vsel %vm685, %v2467, 0
  %v2668 = vsel %vm685, %v2469, 0
  %2670 = vmatprep.subr.bf16.mxu0 %v650
  %2671 = vmatpush1.bf16.msra.mxu0 %v649
  %2672 = vmatprep.subr.bf16.mxu0 %v652
  %2673 = vmatpush1.bf16.msra.mxu0 %v651
  %2674 = vmatprep.subr.bf16.mxu0 %v654
  %2675 = vmatpush1.bf16.msra.mxu0 %v653
  %2676 = vmatprep.subr.bf16.mxu0 %v656
  %2677 = vmatpush1.bf16.msra.mxu0 %v655
  %2678 = vmatprep.subr.bf16.mxu0 %v658
  %2679 = vmatpush1.bf16.msra.mxu0 %v657
  %2680 = vmatprep.subr.bf16.mxu0 %v660
  %2681 = vmatpush1.bf16.msra.mxu0 %v659
  %2682 = vmatprep.subr.bf16.mxu0 %v662
  %2683 = vmatpush1.bf16.msra.mxu0 %v661
  %2684 = vmatprep.subr.bf16.mxu0 %v664
  %2685 = vmatpush1.bf16.msra.mxu0 %v663
  %2686 = vmatprep.subr.bf16.mxu0 %v666
  %2687 = vmatpush1.bf16.msra.mxu0 %v665
  %2688 = vmatprep.subr.bf16.mxu0 0
  %2689 = vmatpush1.bf16.msra.mxu0 0
  %2690 = vmatprep.subr.bf16.mxu0 0
  %2691 = vmatpush1.bf16.msra.mxu0 0
  %2692 = vmatprep.subr.bf16.mxu0 0
  %2693 = vmatpush1.bf16.msra.mxu0 0
  %2694 = vmatprep.subr.bf16.mxu0 0
  %2695 = vmatpush1.bf16.msra.mxu0 0
  %2696 = vmatprep.subr.bf16.mxu0 0
  %2697 = vmatpush1.bf16.msra.mxu0 0
  %2698 = vmatprep.subr.bf16.mxu0 0
  %2699 = vmatpush1.bf16.msra.mxu0 0
  %2700 = vmatprep.subr.bf16.mxu0 0
  %2701 = vmatpush1.bf16.msra.mxu0 0
  %2702 = vmatprep.mubr.bf16.mxu0 %v2521
  %2703 = vmatmul.mubr.bf16.gmra.mrb[0].mxu0 %v2370
  %v2704 = vpop.f32.mrb[0].mxu0
  %v2705 = vadd.f32 0.0, %v2704
  %v2706 = vpop.f32.mrb[0].mxu0
  %v2707 = vadd.f32 0.0, %v2706
  %v2708 = vpop.f32.mrb[0].mxu0
  %v2709 = vadd.f32 0.0, %v2708
  %v2710 = vpop.f32.mrb[0].mxu0
  %v2711 = vadd.f32 0.0, %v2710
  %2712 = vmatprep.mubr.bf16.mxu0 %v2524
  %2713 = vmatmul.mubr.bf16.gmra.mrb[0].mxu0 %v2372
  %v2714 = vpop.f32.mrb[0].mxu0
  %v2715 = vadd.f32 0.0, %v2714
  %v2716 = vpop.f32.mrb[0].mxu0
  %v2717 = vadd.f32 0.0, %v2716
  %v2718 = vpop.f32.mrb[0].mxu0
  %v2719 = vadd.f32 0.0, %v2718
  %v2720 = vpop.f32.mrb[0].mxu0
  %v2721 = vadd.f32 0.0, %v2720
  %2722 = vmatprep.mubr.bf16.mxu0 %v2527
  %2723 = vmatmul.mubr.bf16.gmra.mrb[0].mxu0 %v2374
  %v2724 = vpop.f32.mrb[0].mxu0
  %v2725 = vadd.f32 0.0, %v2724
  %v2726 = vpop.f32.mrb[0].mxu0
  %v2727 = vadd.f32 0.0, %v2726
  %v2728 = vpop.f32.mrb[0].mxu0
  %v2729 = vadd.f32 0.0, %v2728
  %v2730 = vpop.f32.mrb[0].mxu0
  %v2731 = vadd.f32 0.0, %v2730
  %2732 = vmatprep.mubr.bf16.mxu0 %v2530
  %2733 = vmatmul.mubr.bf16.gmra.mrb[0].mxu0 %v2376
  %v2734 = vpop.f32.mrb[0].mxu0
  %v2735 = vadd.f32 0.0, %v2734
  %v2736 = vpop.f32.mrb[0].mxu0
  %v2737 = vadd.f32 0.0, %v2736
  %v2738 = vpop.f32.mrb[0].mxu0
  %v2739 = vadd.f32 0.0, %v2738
  %v2740 = vpop.f32.mrb[0].mxu0
  %v2741 = vadd.f32 0.0, %v2740
  %2742 = vmatprep.mubr.bf16.mxu0 %v2533
  %2743 = vmatmul.mubr.bf16.gmra.mrb[0].mxu0 %v2378
  %v2744 = vpop.f32.mrb[0].mxu0
  %v2745 = vadd.f32 0.0, %v2744
  %v2746 = vpop.f32.mrb[0].mxu0
  %v2747 = vadd.f32 0.0, %v2746
  %v2748 = vpop.f32.mrb[0].mxu0
  %v2749 = vadd.f32 0.0, %v2748
  %v2750 = vpop.f32.mrb[0].mxu0
  %v2751 = vadd.f32 0.0, %v2750
  %2752 = vmatprep.mubr.bf16.mxu0 %v2536
  %2753 = vmatmul.mubr.bf16.gmra.mrb[0].mxu0 %v2380
  %v2754 = vpop.f32.mrb[0].mxu0
  %v2755 = vadd.f32 0.0, %v2754
  %v2756 = vpop.f32.mrb[0].mxu0
  %v2757 = vadd.f32 0.0, %v2756
  %v2758 = vpop.f32.mrb[0].mxu0
  %v2759 = vadd.f32 0.0, %v2758
  %v2760 = vpop.f32.mrb[0].mxu0
  %v2761 = vadd.f32 0.0, %v2760
  %2762 = vmatprep.mubr.bf16.mxu0 %v2539
  %2763 = vmatmul.mubr.bf16.gmra.mrb[0].mxu0 %v2382
  %v2764 = vpop.f32.mrb[0].mxu0
  %v2765 = vadd.f32 0.0, %v2764
  %v2766 = vpop.f32.mrb[0].mxu0
  %v2767 = vadd.f32 0.0, %v2766
  %v2768 = vpop.f32.mrb[0].mxu0
  %v2769 = vadd.f32 0.0, %v2768
  %v2770 = vpop.f32.mrb[0].mxu0
  %v2771 = vadd.f32 0.0, %v2770
  %2772 = vmatprep.mubr.bf16.mxu0 %v2542
  %2773 = vmatmul.mubr.bf16.gmra.mrb[0].mxu0 %v2384
  %v2774 = vpop.f32.mrb[0].mxu0
  %v2775 = vadd.f32 0.0, %v2774
  %v2776 = vpop.f32.mrb[0].mxu0
  %v2777 = vadd.f32 0.0, %v2776
  %v2778 = vpop.f32.mrb[0].mxu0
  %v2779 = vadd.f32 0.0, %v2778
  %v2780 = vpop.f32.mrb[0].mxu0
  %v2781 = vadd.f32 0.0, %v2780
  %2782 = vmatprep.mubr.bf16.mxu0 %v2545
  %2783 = vmatmul.mubr.bf16.gmra.mrb[0].mxu0 %v2386
  %v2784 = vpop.f32.mrb[0].mxu0
  %v2785 = vadd.f32 0.0, %v2784
  %v2786 = vpop.f32.mrb[0].mxu0
  %v2787 = vadd.f32 0.0, %v2786
  %v2788 = vpop.f32.mrb[0].mxu0
  %v2789 = vadd.f32 0.0, %v2788
  %v2790 = vpop.f32.mrb[0].mxu0
  %v2791 = vadd.f32 0.0, %v2790
  %2792 = vmatprep.mubr.bf16.mxu0 %v2548
  %2793 = vmatmul.mubr.bf16.gmra.mrb[0].mxu0 %v2388
  %v2794 = vpop.f32.mrb[0].mxu0
  %v2795 = vadd.f32 0.0, %v2794
  %v2796 = vpop.f32.mrb[0].mxu0
  %v2797 = vadd.f32 0.0, %v2796
  %v2798 = vpop.f32.mrb[0].mxu0
  %v2799 = vadd.f32 0.0, %v2798
  %v2800 = vpop.f32.mrb[0].mxu0
  %v2801 = vadd.f32 0.0, %v2800
  %2802 = vmatprep.mubr.bf16.mxu0 %v2551
  %2803 = vmatmul.mubr.bf16.gmra.mrb[0].mxu0 %v2390
  %v2804 = vpop.f32.mrb[0].mxu0
  %v2805 = vadd.f32 0.0, %v2804
  %v2806 = vpop.f32.mrb[0].mxu0
  %v2807 = vadd.f32 0.0, %v2806
  %v2808 = vpop.f32.mrb[0].mxu0
  %v2809 = vadd.f32 0.0, %v2808
  %v2810 = vpop.f32.mrb[0].mxu0
  %v2811 = vadd.f32 0.0, %v2810
  %2812 = vmatprep.mubr.bf16.mxu0 %v2554
  %2813 = vmatmul.mubr.bf16.gmra.mrb[0].mxu0 %v2392
  %v2814 = vpop.f32.mrb[0].mxu0
  %v2815 = vadd.f32 0.0, %v2814
  %v2816 = vpop.f32.mrb[0].mxu0
  %v2817 = vadd.f32 0.0, %v2816
  %v2818 = vpop.f32.mrb[0].mxu0
  %v2819 = vadd.f32 0.0, %v2818
  %v2820 = vpop.f32.mrb[0].mxu0
  %v2821 = vadd.f32 0.0, %v2820
  %2822 = vmatprep.mubr.bf16.mxu0 %v2557
  %2823 = vmatmul.mubr.bf16.gmra.mrb[0].mxu0 %v2394
  %v2824 = vpop.f32.mrb[0].mxu0
  %v2825 = vadd.f32 0.0, %v2824
  %v2826 = vpop.f32.mrb[0].mxu0
  %v2827 = vadd.f32 0.0, %v2826
  %v2828 = vpop.f32.mrb[0].mxu0
  %v2829 = vadd.f32 0.0, %v2828
  %v2830 = vpop.f32.mrb[0].mxu0
  %v2831 = vadd.f32 0.0, %v2830
  %2832 = vmatprep.mubr.bf16.mxu0 %v2560
  %2833 = vmatmul.mubr.bf16.gmra.mrb[0].mxu0 %v2396
  %v2834 = vpop.f32.mrb[0].mxu0
  %v2835 = vadd.f32 0.0, %v2834
  %v2836 = vpop.f32.mrb[0].mxu0
  %v2837 = vadd.f32 0.0, %v2836
  %v2838 = vpop.f32.mrb[0].mxu0
  %v2839 = vadd.f32 0.0, %v2838
  %v2840 = vpop.f32.mrb[0].mxu0
  %v2841 = vadd.f32 0.0, %v2840
  %2842 = vmatprep.mubr.bf16.mxu0 %v2563
  %2843 = vmatmul.mubr.bf16.gmra.mrb[0].mxu0 %v2398
  %v2844 = vpop.f32.mrb[0].mxu0
  %v2845 = vadd.f32 0.0, %v2844
  %v2846 = vpop.f32.mrb[0].mxu0
  %v2847 = vadd.f32 0.0, %v2846
  %v2848 = vpop.f32.mrb[0].mxu0
  %v2849 = vadd.f32 0.0, %v2848
  %v2850 = vpop.f32.mrb[0].mxu0
  %v2851 = vadd.f32 0.0, %v2850
  %2852 = vmatprep.mubr.bf16.mxu0 %v2566
  %2853 = vmatmul.mubr.bf16.gmra.mrb[0].mxu0 %v2400
  %v2854 = vpop.f32.mrb[0].mxu0
  %v2855 = vadd.f32 0.0, %v2854
  %v2856 = vpop.f32.mrb[0].mxu0
  %v2857 = vadd.f32 0.0, %v2856
  %v2858 = vpop.f32.mrb[0].mxu0
  %v2859 = vadd.f32 0.0, %v2858
  %v2860 = vpop.f32.mrb[0].mxu0
  %v2861 = vadd.f32 0.0, %v2860
  %2862 = vmatprep.mubr.bf16.mxu0 %v2569
  %2863 = vmatmul.mubr.bf16.gmra.mrb[0].mxu0 %v2402
  %v2864 = vpop.f32.mrb[0].mxu0
  %v2865 = vadd.f32 0.0, %v2864
  %v2866 = vpop.f32.mrb[0].mxu0
  %v2867 = vadd.f32 0.0, %v2866
  %v2868 = vpop.f32.mrb[0].mxu0
  %v2869 = vadd.f32 0.0, %v2868
  %v2870 = vpop.f32.mrb[0].mxu0
  %v2871 = vadd.f32 0.0, %v2870
  %2872 = vmatprep.mubr.bf16.mxu0 %v2572
  %2873 = vmatmul.mubr.bf16.gmra.mrb[0].mxu0 %v2404
  %v2874 = vpop.f32.mrb[0].mxu0
  %v2875 = vadd.f32 0.0, %v2874
  %v2876 = vpop.f32.mrb[0].mxu0
  %v2877 = vadd.f32 0.0, %v2876
  %v2878 = vpop.f32.mrb[0].mxu0
  %v2879 = vadd.f32 0.0, %v2878
  %v2880 = vpop.f32.mrb[0].mxu0
  %v2881 = vadd.f32 0.0, %v2880
  %2882 = vmatprep.mubr.bf16.mxu0 %v2575
  %2883 = vmatmul.mubr.bf16.gmra.mrb[0].mxu0 %v2406
  %v2884 = vpop.f32.mrb[0].mxu0
  %v2885 = vadd.f32 0.0, %v2884
  %v2886 = vpop.f32.mrb[0].mxu0
  %v2887 = vadd.f32 0.0, %v2886
  %v2888 = vpop.f32.mrb[0].mxu0
  %v2889 = vadd.f32 0.0, %v2888
  %v2890 = vpop.f32.mrb[0].mxu0
  %v2891 = vadd.f32 0.0, %v2890
  %2892 = vmatprep.mubr.bf16.mxu0 %v2578
  %2893 = vmatmul.mubr.bf16.gmra.mrb[0].mxu0 %v2408
  %v2894 = vpop.f32.mrb[0].mxu0
  %v2895 = vadd.f32 0.0, %v2894
  %v2896 = vpop.f32.mrb[0].mxu0
  %v2897 = vadd.f32 0.0, %v2896
  %v2898 = vpop.f32.mrb[0].mxu0
  %v2899 = vadd.f32 0.0, %v2898
  %v2900 = vpop.f32.mrb[0].mxu0
  %v2901 = vadd.f32 0.0, %v2900
  %2902 = vmatprep.mubr.bf16.mxu0 %v2581
  %2903 = vmatmul.mubr.bf16.gmra.mrb[0].mxu0 %v2410
  %v2904 = vpop.f32.mrb[0].mxu0
  %v2905 = vadd.f32 0.0, %v2904
  %v2906 = vpop.f32.mrb[0].mxu0
  %v2907 = vadd.f32 0.0, %v2906
  %v2908 = vpop.f32.mrb[0].mxu0
  %v2909 = vadd.f32 0.0, %v2908
  %v2910 = vpop.f32.mrb[0].mxu0
  %v2911 = vadd.f32 0.0, %v2910
  %2912 = vmatprep.mubr.bf16.mxu0 %v2584
  %2913 = vmatmul.mubr.bf16.gmra.mrb[0].mxu0 %v2412
  %v2914 = vpop.f32.mrb[0].mxu0
  %v2915 = vadd.f32 0.0, %v2914
  %v2916 = vpop.f32.mrb[0].mxu0
  %v2917 = vadd.f32 0.0, %v2916
  %v2918 = vpop.f32.mrb[0].mxu0
  %v2919 = vadd.f32 0.0, %v2918
  %v2920 = vpop.f32.mrb[0].mxu0
  %v2921 = vadd.f32 0.0, %v2920
  %2922 = vmatprep.mubr.bf16.mxu0 %v2587
  %2923 = vmatmul.mubr.bf16.gmra.mrb[0].mxu0 %v2414
  %v2924 = vpop.f32.mrb[0].mxu0
  %v2925 = vadd.f32 0.0, %v2924
  %v2926 = vpop.f32.mrb[0].mxu0
  %v2927 = vadd.f32 0.0, %v2926
  %v2928 = vpop.f32.mrb[0].mxu0
  %v2929 = vadd.f32 0.0, %v2928
  %v2930 = vpop.f32.mrb[0].mxu0
  %v2931 = vadd.f32 0.0, %v2930
  %2932 = vmatprep.mubr.bf16.mxu0 %v2590
  %2933 = vmatmul.mubr.bf16.gmra.mrb[0].mxu0 %v2416
  %v2934 = vpop.f32.mrb[0].mxu0
  %v2935 = vadd.f32 0.0, %v2934
  %v2936 = vpop.f32.mrb[0].mxu0
  %v2937 = vadd.f32 0.0, %v2936
  %v2938 = vpop.f32.mrb[0].mxu0
  %v2939 = vadd.f32 0.0, %v2938
  %v2940 = vpop.f32.mrb[0].mxu0
  %v2941 = vadd.f32 0.0, %v2940
  %2942 = vmatprep.mubr.bf16.mxu0 %v2593
  %2943 = vmatmul.mubr.bf16.gmra.mrb[0].mxu0 %v2418
  %v2944 = vpop.f32.mrb[0].mxu0
  %v2945 = vadd.f32 0.0, %v2944
  %v2946 = vpop.f32.mrb[0].mxu0
  %v2947 = vadd.f32 0.0, %v2946
  %v2948 = vpop.f32.mrb[0].mxu0
  %v2949 = vadd.f32 0.0, %v2948
  %v2950 = vpop.f32.mrb[0].mxu0
  %v2951 = vadd.f32 0.0, %v2950
  %2952 = vmatprep.mubr.bf16.mxu0 %v2596
  %2953 = vmatmul.mubr.bf16.gmra.mrb[0].mxu0 %v2420
  %v2954 = vpop.f32.mrb[0].mxu0
  %v2955 = vadd.f32 0.0, %v2954
  %v2956 = vpop.f32.mrb[0].mxu0
  %v2957 = vadd.f32 0.0, %v2956
  %v2958 = vpop.f32.mrb[0].mxu0
  %v2959 = vadd.f32 0.0, %v2958
  %v2960 = vpop.f32.mrb[0].mxu0
  %v2961 = vadd.f32 0.0, %v2960
  %2962 = vmatprep.mubr.bf16.mxu0 %v2599
  %2963 = vmatmul.mubr.bf16.gmra.mrb[0].mxu0 %v2422
  %v2964 = vpop.f32.mrb[0].mxu0
  %v2965 = vadd.f32 0.0, %v2964
  %v2966 = vpop.f32.mrb[0].mxu0
  %v2967 = vadd.f32 0.0, %v2966
  %v2968 = vpop.f32.mrb[0].mxu0
  %v2969 = vadd.f32 0.0, %v2968
  %v2970 = vpop.f32.mrb[0].mxu0
  %v2971 = vadd.f32 0.0, %v2970
  %2972 = vmatprep.mubr.bf16.mxu0 %v2602
  %2973 = vmatmul.mubr.bf16.gmra.mrb[0].mxu0 %v2424
  %v2974 = vpop.f32.mrb[0].mxu0
  %v2975 = vadd.f32 0.0, %v2974
  %v2976 = vpop.f32.mrb[0].mxu0
  %v2977 = vadd.f32 0.0, %v2976
  %v2978 = vpop.f32.mrb[0].mxu0
  %v2979 = vadd.f32 0.0, %v2978
  %v2980 = vpop.f32.mrb[0].mxu0
  %v2981 = vadd.f32 0.0, %v2980
  %2982 = vmatprep.mubr.bf16.mxu0 %v2605
  %2983 = vmatmul.mubr.bf16.gmra.mrb[0].mxu0 %v2426
  %v2984 = vpop.f32.mrb[0].mxu0
  %v2985 = vadd.f32 0.0, %v2984
  %v2986 = vpop.f32.mrb[0].mxu0
  %v2987 = vadd.f32 0.0, %v2986
  %v2988 = vpop.f32.mrb[0].mxu0
  %v2989 = vadd.f32 0.0, %v2988
  %v2990 = vpop.f32.mrb[0].mxu0
  %v2991 = vadd.f32 0.0, %v2990
  %2992 = vmatprep.mubr.bf16.mxu0 %v2608
  %2993 = vmatmul.mubr.bf16.gmra.mrb[0].mxu0 %v2428
  %v2994 = vpop.f32.mrb[0].mxu0
  %v2995 = vadd.f32 0.0, %v2994
  %v2996 = vpop.f32.mrb[0].mxu0
  %v2997 = vadd.f32 0.0, %v2996
  %v2998 = vpop.f32.mrb[0].mxu0
  %v2999 = vadd.f32 0.0, %v2998
  %v3000 = vpop.f32.mrb[0].mxu0
  %v3001 = vadd.f32 0.0, %v3000
  %3002 = vmatprep.mubr.bf16.mxu0 %v2611
  %3003 = vmatmul.mubr.bf16.gmra.mrb[0].mxu0 %v2430
  %v3004 = vpop.f32.mrb[0].mxu0
  %v3005 = vadd.f32 0.0, %v3004
  %v3006 = vpop.f32.mrb[0].mxu0
  %v3007 = vadd.f32 0.0, %v3006
  %v3008 = vpop.f32.mrb[0].mxu0
  %v3009 = vadd.f32 0.0, %v3008
  %v3010 = vpop.f32.mrb[0].mxu0
  %v3011 = vadd.f32 0.0, %v3010
  %3012 = vmatprep.mubr.bf16.mxu0 %v2614
  %3013 = vmatmul.mubr.bf16.gmra.mrb[0].mxu0 %v2432
  %v3014 = vpop.f32.mrb[0].mxu0
  %v3015 = vadd.f32 0.0, %v3014
  %v3016 = vpop.f32.mrb[0].mxu0
  %v3017 = vadd.f32 0.0, %v3016
  %v3018 = vpop.f32.mrb[0].mxu0
  %v3019 = vadd.f32 0.0, %v3018
  %v3020 = vpop.f32.mrb[0].mxu0
  %v3021 = vadd.f32 0.0, %v3020
  %3022 = vmatprep.mubr.bf16.mxu0 %v2617
  %3023 = vmatmul.mubr.bf16.gmra.mrb[0].mxu0 %v2434
  %v3024 = vpop.f32.mrb[0].mxu0
  %v3025 = vadd.f32 0.0, %v3024
  %v3026 = vpop.f32.mrb[0].mxu0
  %v3027 = vadd.f32 0.0, %v3026
  %v3028 = vpop.f32.mrb[0].mxu0
  %v3029 = vadd.f32 0.0, %v3028
  %v3030 = vpop.f32.mrb[0].mxu0
  %v3031 = vadd.f32 0.0, %v3030
  %3032 = vmatprep.mubr.bf16.mxu0 %v2620
  %3033 = vmatmul.mubr.bf16.gmra.mrb[0].mxu0 %v2436
  %v3034 = vpop.f32.mrb[0].mxu0
  %v3035 = vadd.f32 0.0, %v3034
  %v3036 = vpop.f32.mrb[0].mxu0
  %v3037 = vadd.f32 0.0, %v3036
  %v3038 = vpop.f32.mrb[0].mxu0
  %v3039 = vadd.f32 0.0, %v3038
  %v3040 = vpop.f32.mrb[0].mxu0
  %v3041 = vadd.f32 0.0, %v3040
  %3042 = vmatprep.mubr.bf16.mxu0 %v2623
  %3043 = vmatmul.mubr.bf16.gmra.mrb[0].mxu0 %v2438
  %v3044 = vpop.f32.mrb[0].mxu0
  %v3045 = vadd.f32 0.0, %v3044
  %v3046 = vpop.f32.mrb[0].mxu0
  %v3047 = vadd.f32 0.0, %v3046
  %v3048 = vpop.f32.mrb[0].mxu0
  %v3049 = vadd.f32 0.0, %v3048
  %v3050 = vpop.f32.mrb[0].mxu0
  %v3051 = vadd.f32 0.0, %v3050
  %3052 = vmatprep.mubr.bf16.mxu0 %v2626
  %3053 = vmatmul.mubr.bf16.gmra.mrb[0].mxu0 %v2440
  %v3054 = vpop.f32.mrb[0].mxu0
  %v3055 = vadd.f32 0.0, %v3054
  %v3056 = vpop.f32.mrb[0].mxu0
  %v3057 = vadd.f32 0.0, %v3056
  %v3058 = vpop.f32.mrb[0].mxu0
  %v3059 = vadd.f32 0.0, %v3058
  %v3060 = vpop.f32.mrb[0].mxu0
  %v3061 = vadd.f32 0.0, %v3060
  %3062 = vmatprep.mubr.bf16.mxu0 %v2629
  %3063 = vmatmul.mubr.bf16.gmra.mrb[0].mxu0 %v2442
  %v3064 = vpop.f32.mrb[0].mxu0
  %v3065 = vadd.f32 0.0, %v3064
  %v3066 = vpop.f32.mrb[0].mxu0
  %v3067 = vadd.f32 0.0, %v3066
  %v3068 = vpop.f32.mrb[0].mxu0
  %v3069 = vadd.f32 0.0, %v3068
  %v3070 = vpop.f32.mrb[0].mxu0
  %v3071 = vadd.f32 0.0, %v3070
  %3072 = vmatprep.mubr.bf16.mxu0 %v2632
  %3073 = vmatmul.mubr.bf16.gmra.mrb[0].mxu0 %v2444
  %v3074 = vpop.f32.mrb[0].mxu0
  %v3075 = vadd.f32 0.0, %v3074
  %v3076 = vpop.f32.mrb[0].mxu0
  %v3077 = vadd.f32 0.0, %v3076
  %v3078 = vpop.f32.mrb[0].mxu0
  %v3079 = vadd.f32 0.0, %v3078
  %v3080 = vpop.f32.mrb[0].mxu0
  %v3081 = vadd.f32 0.0, %v3080
  %3082 = vmatprep.mubr.bf16.mxu0 %v2635
  %3083 = vmatmul.mubr.bf16.gmra.mrb[0].mxu0 %v2446
  %v3084 = vpop.f32.mrb[0].mxu0
  %v3085 = vadd.f32 0.0, %v3084
  %v3086 = vpop.f32.mrb[0].mxu0
  %v3087 = vadd.f32 0.0, %v3086
  %v3088 = vpop.f32.mrb[0].mxu0
  %v3089 = vadd.f32 0.0, %v3088
  %v3090 = vpop.f32.mrb[0].mxu0
  %v3091 = vadd.f32 0.0, %v3090
  %3092 = vmatprep.mubr.bf16.mxu0 %v2638
  %3093 = vmatmul.mubr.bf16.gmra.mrb[0].mxu0 %v2448
  %v3094 = vpop.f32.mrb[0].mxu0
  %v3095 = vadd.f32 0.0, %v3094
  %v3096 = vpop.f32.mrb[0].mxu0
  %v3097 = vadd.f32 0.0, %v3096
  %v3098 = vpop.f32.mrb[0].mxu0
  %v3099 = vadd.f32 0.0, %v3098
  %v3100 = vpop.f32.mrb[0].mxu0
  %v3101 = vadd.f32 0.0, %v3100
  %3102 = vmatprep.mubr.bf16.mxu0 %v2641
  %3103 = vmatmul.mubr.bf16.gmra.mrb[0].mxu0 %v2450
  %v3104 = vpop.f32.mrb[0].mxu0
  %v3105 = vadd.f32 0.0, %v3104
  %v3106 = vpop.f32.mrb[0].mxu0
  %v3107 = vadd.f32 0.0, %v3106
  %v3108 = vpop.f32.mrb[0].mxu0
  %v3109 = vadd.f32 0.0, %v3108
  %v3110 = vpop.f32.mrb[0].mxu0
  %v3111 = vadd.f32 0.0, %v3110
  %3112 = vmatprep.mubr.bf16.mxu0 %v2644
  %3113 = vmatmul.mubr.bf16.gmra.mrb[0].mxu0 %v2452
  %v3114 = vpop.f32.mrb[0].mxu0
  %v3115 = vadd.f32 0.0, %v3114
  %v3116 = vpop.f32.mrb[0].mxu0
  %v3117 = vadd.f32 0.0, %v3116
  %v3118 = vpop.f32.mrb[0].mxu0
  %v3119 = vadd.f32 0.0, %v3118
  %v3120 = vpop.f32.mrb[0].mxu0
  %v3121 = vadd.f32 0.0, %v3120
  %3122 = vmatprep.mubr.bf16.mxu0 %v2647
  %3123 = vmatmul.mubr.bf16.gmra.mrb[0].mxu0 %v2454
  %v3124 = vpop.f32.mrb[0].mxu0
  %v3125 = vadd.f32 0.0, %v3124
  %v3126 = vpop.f32.mrb[0].mxu0
  %v3127 = vadd.f32 0.0, %v3126
  %v3128 = vpop.f32.mrb[0].mxu0
  %v3129 = vadd.f32 0.0, %v3128
  %v3130 = vpop.f32.mrb[0].mxu0
  %v3131 = vadd.f32 0.0, %v3130
  %3132 = vmatprep.mubr.bf16.mxu0 %v2650
  %3133 = vmatmul.mubr.bf16.gmra.mrb[0].mxu0 %v2456
  %v3134 = vpop.f32.mrb[0].mxu0
  %v3135 = vadd.f32 0.0, %v3134
  %v3136 = vpop.f32.mrb[0].mxu0
  %v3137 = vadd.f32 0.0, %v3136
  %v3138 = vpop.f32.mrb[0].mxu0
  %v3139 = vadd.f32 0.0, %v3138
  %v3140 = vpop.f32.mrb[0].mxu0
  %v3141 = vadd.f32 0.0, %v3140
  %3142 = vmatprep.mubr.bf16.mxu0 %v2653
  %3143 = vmatmul.mubr.bf16.gmra.mrb[0].mxu0 %v2458
  %v3144 = vpop.f32.mrb[0].mxu0
  %v3145 = vadd.f32 0.0, %v3144
  %v3146 = vpop.f32.mrb[0].mxu0
  %v3147 = vadd.f32 0.0, %v3146
  %v3148 = vpop.f32.mrb[0].mxu0
  %v3149 = vadd.f32 0.0, %v3148
  %v3150 = vpop.f32.mrb[0].mxu0
  %v3151 = vadd.f32 0.0, %v3150
  %3152 = vmatprep.mubr.bf16.mxu0 %v2656
  %3153 = vmatmul.mubr.bf16.gmra.mrb[0].mxu0 %v2460
  %v3154 = vpop.f32.mrb[0].mxu0
  %v3155 = vadd.f32 0.0, %v3154
  %v3156 = vpop.f32.mrb[0].mxu0
  %v3157 = vadd.f32 0.0, %v3156
  %v3158 = vpop.f32.mrb[0].mxu0
  %v3159 = vadd.f32 0.0, %v3158
  %v3160 = vpop.f32.mrb[0].mxu0
  %v3161 = vadd.f32 0.0, %v3160
  %3162 = vmatprep.mubr.bf16.mxu0 %v2659
  %3163 = vmatmul.mubr.bf16.gmra.mrb[0].mxu0 %v2462
  %v3164 = vpop.f32.mrb[0].mxu0
  %v3165 = vadd.f32 0.0, %v3164
  %v3166 = vpop.f32.mrb[0].mxu0
  %v3167 = vadd.f32 0.0, %v3166
  %v3168 = vpop.f32.mrb[0].mxu0
  %v3169 = vadd.f32 0.0, %v3168
  %v3170 = vpop.f32.mrb[0].mxu0
  %v3171 = vadd.f32 0.0, %v3170
  %3172 = vmatprep.mubr.bf16.mxu0 %v2662
  %3173 = vmatmul.mubr.bf16.gmra.mrb[0].mxu0 %v2464
  %v3174 = vpop.f32.mrb[0].mxu0
  %v3175 = vadd.f32 0.0, %v3174
  %v3176 = vpop.f32.mrb[0].mxu0
  %v3177 = vadd.f32 0.0, %v3176
  %v3178 = vpop.f32.mrb[0].mxu0
  %v3179 = vadd.f32 0.0, %v3178
  %v3180 = vpop.f32.mrb[0].mxu0
  %v3181 = vadd.f32 0.0, %v3180
  %3182 = vmatprep.mubr.bf16.mxu0 %v2665
  %3183 = vmatmul.mubr.bf16.gmra.mrb[0].mxu0 %v2466
  %v3184 = vpop.f32.mrb[0].mxu0
  %v3185 = vadd.f32 0.0, %v3184
  %v3186 = vpop.f32.mrb[0].mxu0
  %v3187 = vadd.f32 0.0, %v3186
  %v3188 = vpop.f32.mrb[0].mxu0
  %v3189 = vadd.f32 0.0, %v3188
  %v3190 = vpop.f32.mrb[0].mxu0
  %v3191 = vadd.f32 0.0, %v3190
  %3192 = vmatprep.mubr.bf16.mxu0 %v2668
  %3193 = vmatmul.mubr.bf16.gmra.mrb[0].mxu0 %v2468
  %v3194 = vpop.f32.mrb[0].mxu0
  %v3195 = vadd.f32 0.0, %v3194
  %v3196 = vpop.f32.mrb[0].mxu0
  %v3197 = vadd.f32 0.0, %v3196
  %v3198 = vpop.f32.mrb[0].mxu0
  %v3199 = vadd.f32 0.0, %v3198
  %v3200 = vpop.f32.mrb[0].mxu0
  %v3201 = vadd.f32 0.0, %v3200
  %3202 = vdwg.mxu0
  %v3203 = vmax.f32 %v2705, %v2707
  %v3204 = vmax.f32 %v2709, %v2711
  %v3205 = vmax.f32 %v2715, %v2717
  %v3206 = vmax.f32 %v2719, %v2721
  %v3207 = vmax.f32 %v2725, %v2727
  %v3208 = vmax.f32 %v2729, %v2731
  %v3209 = vmax.f32 %v2735, %v2737
  %v3210 = vmax.f32 %v2739, %v2741
  %v3211 = vmax.f32 %v2745, %v2747
  %v3212 = vmax.f32 %v2749, %v2751
  %v3213 = vmax.f32 %v2755, %v2757
  %v3214 = vmax.f32 %v2759, %v2761
  %v3215 = vmax.f32 %v2765, %v2767
  %v3216 = vmax.f32 %v2769, %v2771
  %v3217 = vmax.f32 %v2775, %v2777
  %v3218 = vmax.f32 %v2779, %v2781
  %v3219 = vmax.f32 %v2785, %v2787
  %v3220 = vmax.f32 %v2789, %v2791
  %v3221 = vmax.f32 %v2795, %v2797
  %v3222 = vmax.f32 %v2799, %v2801
  %v3223 = vmax.f32 %v2805, %v2807
  %v3224 = vmax.f32 %v2809, %v2811
  %v3225 = vmax.f32 %v2815, %v2817
  %v3226 = vmax.f32 %v2819, %v2821
  %v3227 = vmax.f32 %v2825, %v2827
  %v3228 = vmax.f32 %v2829, %v2831
  %v3229 = vmax.f32 %v2835, %v2837
  %v3230 = vmax.f32 %v2839, %v2841
  %v3231 = vmax.f32 %v2845, %v2847
  %v3232 = vmax.f32 %v2849, %v2851
  %v3233 = vmax.f32 %v2855, %v2857
  %v3234 = vmax.f32 %v2859, %v2861
  %v3235 = vmax.f32 %v2865, %v2867
  %v3236 = vmax.f32 %v2869, %v2871
  %v3237 = vmax.f32 %v2875, %v2877
  %v3238 = vmax.f32 %v2879, %v2881
  %v3239 = vmax.f32 %v2885, %v2887
  %v3240 = vmax.f32 %v2889, %v2891
  %v3241 = vmax.f32 %v2895, %v2897
  %v3242 = vmax.f32 %v2899, %v2901
  %v3243 = vmax.f32 %v2905, %v2907
  %v3244 = vmax.f32 %v2909, %v2911
  %v3245 = vmax.f32 %v2915, %v2917
  %v3246 = vmax.f32 %v2919, %v2921
  %v3247 = vmax.f32 %v2925, %v2927
  %v3248 = vmax.f32 %v2929, %v2931
  %v3249 = vmax.f32 %v2935, %v2937
  %v3250 = vmax.f32 %v2939, %v2941
  %v3251 = vmax.f32 %v2945, %v2947
  %v3252 = vmax.f32 %v2949, %v2951
  %v3253 = vmax.f32 %v2955, %v2957
  %v3254 = vmax.f32 %v2959, %v2961
  %v3255 = vmax.f32 %v2965, %v2967
  %v3256 = vmax.f32 %v2969, %v2971
  %v3257 = vmax.f32 %v2975, %v2977
  %v3258 = vmax.f32 %v2979, %v2981
  %v3259 = vmax.f32 %v2985, %v2987
  %v3260 = vmax.f32 %v2989, %v2991
  %v3261 = vmax.f32 %v2995, %v2997
  %v3262 = vmax.f32 %v2999, %v3001
  %v3263 = vmax.f32 %v3005, %v3007
  %v3264 = vmax.f32 %v3009, %v3011
  %v3265 = vmax.f32 %v3015, %v3017
  %v3266 = vmax.f32 %v3019, %v3021
  %v3267 = vmax.f32 %v3025, %v3027
  %v3268 = vmax.f32 %v3029, %v3031
  %v3269 = vmax.f32 %v3035, %v3037
  %v3270 = vmax.f32 %v3039, %v3041
  %v3271 = vmax.f32 %v3045, %v3047
  %v3272 = vmax.f32 %v3049, %v3051
  %v3273 = vmax.f32 %v3055, %v3057
  %v3274 = vmax.f32 %v3059, %v3061
  %v3275 = vmax.f32 %v3065, %v3067
  %v3276 = vmax.f32 %v3069, %v3071
  %v3277 = vmax.f32 %v3075, %v3077
  %v3278 = vmax.f32 %v3079, %v3081
  %v3279 = vmax.f32 %v3085, %v3087
  %v3280 = vmax.f32 %v3089, %v3091
  %v3281 = vmax.f32 %v3095, %v3097
  %v3282 = vmax.f32 %v3099, %v3101
  %v3283 = vmax.f32 %v3105, %v3107
  %v3284 = vmax.f32 %v3109, %v3111
  %v3285 = vmax.f32 %v3115, %v3117
  %v3286 = vmax.f32 %v3119, %v3121
  %v3287 = vmax.f32 %v3125, %v3127
  %v3288 = vmax.f32 %v3129, %v3131
  %v3289 = vmax.f32 %v3135, %v3137
  %v3290 = vmax.f32 %v3139, %v3141
  %v3291 = vmax.f32 %v3145, %v3147
  %v3292 = vmax.f32 %v3149, %v3151
  %v3293 = vmax.f32 %v3155, %v3157
  %v3294 = vmax.f32 %v3159, %v3161
  %v3295 = vmax.f32 %v3165, %v3167
  %v3296 = vmax.f32 %v3169, %v3171
  %v3297 = vmax.f32 %v3175, %v3177
  %v3298 = vmax.f32 %v3179, %v3181
  %v3299 = vmax.f32 %v3185, %v3187
  %v3300 = vmax.f32 %v3189, %v3191
  %v3301 = vmax.f32 %v3195, %v3197
  %v3302 = vmax.f32 %v3199, %v3201
  %3403 = vrot.lane.b32.xlu0 %v3203, 64
  %v3404 = vpop.permute.xlu0 %3403
  %3405 = vrot.lane.b32.xlu0 %v3204, 64
  %v3406 = vpop.permute.xlu0 %3405
  %3407 = vrot.lane.b32.xlu0 %v3205, 64
  %v3408 = vpop.permute.xlu0 %3407
  %3409 = vrot.lane.b32.xlu0 %v3206, 64
  %v3410 = vpop.permute.xlu0 %3409
  %3411 = vrot.lane.b32.xlu0 %v3207, 64
  %v3412 = vpop.permute.xlu0 %3411
  %3413 = vrot.lane.b32.xlu0 %v3208, 64
  %v3414 = vpop.permute.xlu0 %3413
  %3415 = vrot.lane.b32.xlu0 %v3209, 64
  %v3416 = vpop.permute.xlu0 %3415
  %3417 = vrot.lane.b32.xlu0 %v3210, 64
  %v3418 = vpop.permute.xlu0 %3417
  %3419 = vrot.lane.b32.xlu0 %v3211, 64
  %v3420 = vpop.permute.xlu0 %3419
  %3421 = vrot.lane.b32.xlu0 %v3212, 64
  %v3422 = vpop.permute.xlu0 %3421
  %3423 = vrot.lane.b32.xlu0 %v3213, 64
  %v3424 = vpop.permute.xlu0 %3423
  %3425 = vrot.lane.b32.xlu0 %v3214, 64
  %v3426 = vpop.permute.xlu0 %3425
  %3427 = vrot.lane.b32.xlu0 %v3215, 64
  %v3428 = vpop.permute.xlu0 %3427
  %3429 = vrot.lane.b32.xlu0 %v3216, 64
  %v3430 = vpop.permute.xlu0 %3429
  %3431 = vrot.lane.b32.xlu0 %v3217, 64
  %v3432 = vpop.permute.xlu0 %3431
  %3433 = vrot.lane.b32.xlu0 %v3218, 64
  %v3434 = vpop.permute.xlu0 %3433
  %3435 = vrot.lane.b32.xlu0 %v3219, 64
  %v3436 = vpop.permute.xlu0 %3435
  %3437 = vrot.lane.b32.xlu0 %v3220, 64
  %v3438 = vpop.permute.xlu0 %3437
  %3439 = vrot.lane.b32.xlu0 %v3221, 64
  %v3440 = vpop.permute.xlu0 %3439
  %3441 = vrot.lane.b32.xlu0 %v3222, 64
  %v3442 = vpop.permute.xlu0 %3441
  %3443 = vrot.lane.b32.xlu0 %v3223, 64
  %v3444 = vpop.permute.xlu0 %3443
  %3445 = vrot.lane.b32.xlu0 %v3224, 64
  %v3446 = vpop.permute.xlu0 %3445
  %3447 = vrot.lane.b32.xlu0 %v3225, 64
  %v3448 = vpop.permute.xlu0 %3447
  %3449 = vrot.lane.b32.xlu0 %v3226, 64
  %v3450 = vpop.permute.xlu0 %3449
  %3451 = vrot.lane.b32.xlu0 %v3227, 64
  %v3452 = vpop.permute.xlu0 %3451
  %3453 = vrot.lane.b32.xlu0 %v3228, 64
  %v3454 = vpop.permute.xlu0 %3453
  %3455 = vrot.lane.b32.xlu0 %v3229, 64
  %v3456 = vpop.permute.xlu0 %3455
  %3457 = vrot.lane.b32.xlu0 %v3230, 64
  %v3458 = vpop.permute.xlu0 %3457
  %3459 = vrot.lane.b32.xlu0 %v3231, 64
  %v3460 = vpop.permute.xlu0 %3459
  %3461 = vrot.lane.b32.xlu0 %v3232, 64
  %v3462 = vpop.permute.xlu0 %3461
  %3463 = vrot.lane.b32.xlu0 %v3233, 64
  %v3464 = vpop.permute.xlu0 %3463
  %3465 = vrot.lane.b32.xlu0 %v3234, 64
  %v3466 = vpop.permute.xlu0 %3465
  %3467 = vrot.lane.b32.xlu0 %v3235, 64
  %v3468 = vpop.permute.xlu0 %3467
  %3469 = vrot.lane.b32.xlu0 %v3236, 64
  %v3470 = vpop.permute.xlu0 %3469
  %3471 = vrot.lane.b32.xlu0 %v3237, 64
  %v3472 = vpop.permute.xlu0 %3471
  %3473 = vrot.lane.b32.xlu0 %v3238, 64
  %v3474 = vpop.permute.xlu0 %3473
  %3475 = vrot.lane.b32.xlu0 %v3239, 64
  %v3476 = vpop.permute.xlu0 %3475
  %3477 = vrot.lane.b32.xlu0 %v3240, 64
  %v3478 = vpop.permute.xlu0 %3477
  %3479 = vrot.lane.b32.xlu0 %v3241, 64
  %v3480 = vpop.permute.xlu0 %3479
  %3481 = vrot.lane.b32.xlu0 %v3242, 64
  %v3482 = vpop.permute.xlu0 %3481
  %3483 = vrot.lane.b32.xlu0 %v3243, 64
  %v3484 = vpop.permute.xlu0 %3483
  %3485 = vrot.lane.b32.xlu0 %v3244, 64
  %v3486 = vpop.permute.xlu0 %3485
  %3487 = vrot.lane.b32.xlu0 %v3245, 64
  %v3488 = vpop.permute.xlu0 %3487
  %3489 = vrot.lane.b32.xlu0 %v3246, 64
  %v3490 = vpop.permute.xlu0 %3489
  %3491 = vrot.lane.b32.xlu0 %v3247, 64
  %v3492 = vpop.permute.xlu0 %3491
  %3493 = vrot.lane.b32.xlu0 %v3248, 64
  %v3494 = vpop.permute.xlu0 %3493
  %3495 = vrot.lane.b32.xlu0 %v3249, 64
  %v3496 = vpop.permute.xlu0 %3495
  %3497 = vrot.lane.b32.xlu0 %v3250, 64
  %v3498 = vpop.permute.xlu0 %3497
  %3499 = vrot.lane.b32.xlu0 %v3251, 64
  %v3500 = vpop.permute.xlu0 %3499
  %3501 = vrot.lane.b32.xlu0 %v3252, 64
  %v3502 = vpop.permute.xlu0 %3501
  %3503 = vrot.lane.b32.xlu0 %v3253, 64
  %v3504 = vpop.permute.xlu0 %3503
  %3505 = vrot.lane.b32.xlu0 %v3254, 64
  %v3506 = vpop.permute.xlu0 %3505
  %3507 = vrot.lane.b32.xlu0 %v3255, 64
  %v3508 = vpop.permute.xlu0 %3507
  %3509 = vrot.lane.b32.xlu0 %v3256, 64
  %v3510 = vpop.permute.xlu0 %3509
  %3511 = vrot.lane.b32.xlu0 %v3257, 64
  %v3512 = vpop.permute.xlu0 %3511
  %3513 = vrot.lane.b32.xlu0 %v3258, 64
  %v3514 = vpop.permute.xlu0 %3513
  %3515 = vrot.lane.b32.xlu0 %v3259, 64
  %v3516 = vpop.permute.xlu0 %3515
  %3517 = vrot.lane.b32.xlu0 %v3260, 64
  %v3518 = vpop.permute.xlu0 %3517
  %3519 = vrot.lane.b32.xlu0 %v3261, 64
  %v3520 = vpop.permute.xlu0 %3519
  %3521 = vrot.lane.b32.xlu0 %v3262, 64
  %v3522 = vpop.permute.xlu0 %3521
  %3523 = vrot.lane.b32.xlu0 %v3263, 64
  %v3524 = vpop.permute.xlu0 %3523
  %3525 = vrot.lane.b32.xlu0 %v3264, 64
  %v3526 = vpop.permute.xlu0 %3525
  %3527 = vrot.lane.b32.xlu0 %v3265, 64
  %v3528 = vpop.permute.xlu0 %3527
  %3529 = vrot.lane.b32.xlu0 %v3266, 64
  %v3530 = vpop.permute.xlu0 %3529
  %3531 = vrot.lane.b32.xlu0 %v3267, 64
  %v3532 = vpop.permute.xlu0 %3531
  %3533 = vrot.lane.b32.xlu0 %v3268, 64
  %v3534 = vpop.permute.xlu0 %3533
  %3535 = vrot.lane.b32.xlu0 %v3269, 64
  %v3536 = vpop.permute.xlu0 %3535
  %3537 = vrot.lane.b32.xlu0 %v3270, 64
  %v3538 = vpop.permute.xlu0 %3537
  %3539 = vrot.lane.b32.xlu0 %v3271, 64
  %v3540 = vpop.permute.xlu0 %3539
  %3541 = vrot.lane.b32.xlu0 %v3272, 64
  %v3542 = vpop.permute.xlu0 %3541
  %3543 = vrot.lane.b32.xlu0 %v3273, 64
  %v3544 = vpop.permute.xlu0 %3543
  %3545 = vrot.lane.b32.xlu0 %v3274, 64
  %v3546 = vpop.permute.xlu0 %3545
  %3547 = vrot.lane.b32.xlu0 %v3275, 64
  %v3548 = vpop.permute.xlu0 %3547
  %3549 = vrot.lane.b32.xlu0 %v3276, 64
  %v3550 = vpop.permute.xlu0 %3549
  %3551 = vrot.lane.b32.xlu0 %v3277, 64
  %v3552 = vpop.permute.xlu0 %3551
  %3553 = vrot.lane.b32.xlu0 %v3278, 64
  %v3554 = vpop.permute.xlu0 %3553
  %3555 = vrot.lane.b32.xlu0 %v3279, 64
  %v3556 = vpop.permute.xlu0 %3555
  %3557 = vrot.lane.b32.xlu0 %v3280, 64
  %v3558 = vpop.permute.xlu0 %3557
  %3559 = vrot.lane.b32.xlu0 %v3281, 64
  %v3560 = vpop.permute.xlu0 %3559
  %3561 = vrot.lane.b32.xlu0 %v3282, 64
  %v3562 = vpop.permute.xlu0 %3561
  %3563 = vrot.lane.b32.xlu0 %v3283, 64
  %v3564 = vpop.permute.xlu0 %3563
  %3565 = vrot.lane.b32.xlu0 %v3284, 64
  %v3566 = vpop.permute.xlu0 %3565
  %3567 = vrot.lane.b32.xlu0 %v3285, 64
  %v3568 = vpop.permute.xlu0 %3567
  %3569 = vrot.lane.b32.xlu0 %v3286, 64
  %v3570 = vpop.permute.xlu0 %3569
  %3571 = vrot.lane.b32.xlu0 %v3287, 64
  %v3572 = vpop.permute.xlu0 %3571
  %3573 = vrot.lane.b32.xlu0 %v3288, 64
  %v3574 = vpop.permute.xlu0 %3573
  %3575 = vrot.lane.b32.xlu0 %v3289, 64
  %v3576 = vpop.permute.xlu0 %3575
  %3577 = vrot.lane.b32.xlu0 %v3290, 64
  %v3578 = vpop.permute.xlu0 %3577
  %3579 = vrot.lane.b32.xlu0 %v3291, 64
  %v3580 = vpop.permute.xlu0 %3579
  %3581 = vrot.lane.b32.xlu0 %v3292, 64
  %v3582 = vpop.permute.xlu0 %3581
  %3583 = vrot.lane.b32.xlu0 %v3293, 64
  %v3584 = vpop.permute.xlu0 %3583
  %3585 = vrot.lane.b32.xlu0 %v3294, 64
  %v3586 = vpop.permute.xlu0 %3585
  %3587 = vrot.lane.b32.xlu0 %v3295, 64
  %v3588 = vpop.permute.xlu0 %3587
  %3589 = vrot.lane.b32.xlu0 %v3296, 64
  %v3590 = vpop.permute.xlu0 %3589
  %3591 = vrot.lane.b32.xlu0 %v3297, 64
  %v3592 = vpop.permute.xlu0 %3591
  %3593 = vrot.lane.b32.xlu0 %v3298, 64
  %v3594 = vpop.permute.xlu0 %3593
  %3595 = vrot.lane.b32.xlu0 %v3299, 64
  %v3596 = vpop.permute.xlu0 %3595
  %3597 = vrot.lane.b32.xlu0 %v3300, 64
  %v3598 = vpop.permute.xlu0 %3597
  %3599 = vrot.lane.b32.xlu0 %v3301, 64
  %v3600 = vpop.permute.xlu0 %3599
  %3601 = vrot.lane.b32.xlu0 %v3302, 64
  %v3602 = vpop.permute.xlu0 %3601
  %v3703 = vmax.f32 %v3203, %v3404
  %v3704 = vmax.f32 %v3204, %v3406
  %v3705 = vmax.f32 %v3205, %v3408
  %v3706 = vmax.f32 %v3206, %v3410
  %v3707 = vmax.f32 %v3207, %v3412
  %v3708 = vmax.f32 %v3208, %v3414
  %v3709 = vmax.f32 %v3209, %v3416
  %v3710 = vmax.f32 %v3210, %v3418
  %v3711 = vmax.f32 %v3211, %v3420
  %v3712 = vmax.f32 %v3212, %v3422
  %v3713 = vmax.f32 %v3213, %v3424
  %v3714 = vmax.f32 %v3214, %v3426
  %v3715 = vmax.f32 %v3215, %v3428
  %v3716 = vmax.f32 %v3216, %v3430
  %v3717 = vmax.f32 %v3217, %v3432
  %v3718 = vmax.f32 %v3218, %v3434
  %v3719 = vmax.f32 %v3219, %v3436
  %v3720 = vmax.f32 %v3220, %v3438
  %v3721 = vmax.f32 %v3221, %v3440
  %v3722 = vmax.f32 %v3222, %v3442
  %v3723 = vmax.f32 %v3223, %v3444
  %v3724 = vmax.f32 %v3224, %v3446
  %v3725 = vmax.f32 %v3225, %v3448
  %v3726 = vmax.f32 %v3226, %v3450
  %v3727 = vmax.f32 %v3227, %v3452
  %v3728 = vmax.f32 %v3228, %v3454
  %v3729 = vmax.f32 %v3229, %v3456
  %v3730 = vmax.f32 %v3230, %v3458
  %v3731 = vmax.f32 %v3231, %v3460
  %v3732 = vmax.f32 %v3232, %v3462
  %v3733 = vmax.f32 %v3233, %v3464
  %v3734 = vmax.f32 %v3234, %v3466
  %v3735 = vmax.f32 %v3235, %v3468
  %v3736 = vmax.f32 %v3236, %v3470
  %v3737 = vmax.f32 %v3237, %v3472
  %v3738 = vmax.f32 %v3238, %v3474
  %v3739 = vmax.f32 %v3239, %v3476
  %v3740 = vmax.f32 %v3240, %v3478
  %v3741 = vmax.f32 %v3241, %v3480
  %v3742 = vmax.f32 %v3242, %v3482
  %v3743 = vmax.f32 %v3243, %v3484
  %v3744 = vmax.f32 %v3244, %v3486
  %v3745 = vmax.f32 %v3245, %v3488
  %v3746 = vmax.f32 %v3246, %v3490
  %v3747 = vmax.f32 %v3247, %v3492
  %v3748 = vmax.f32 %v3248, %v3494
  %v3749 = vmax.f32 %v3249, %v3496
  %v3750 = vmax.f32 %v3250, %v3498
  %v3751 = vmax.f32 %v3251, %v3500
  %v3752 = vmax.f32 %v3252, %v3502
  %v3753 = vmax.f32 %v3253, %v3504
  %v3754 = vmax.f32 %v3254, %v3506
  %v3755 = vmax.f32 %v3255, %v3508
  %v3756 = vmax.f32 %v3256, %v3510
  %v3757 = vmax.f32 %v3257, %v3512
  %v3758 = vmax.f32 %v3258, %v3514
  %v3759 = vmax.f32 %v3259, %v3516
  %v3760 = vmax.f32 %v3260, %v3518
  %v3761 = vmax.f32 %v3261, %v3520
  %v3762 = vmax.f32 %v3262, %v3522
  %v3763 = vmax.f32 %v3263, %v3524
  %v3764 = vmax.f32 %v3264, %v3526
  %v3765 = vmax.f32 %v3265, %v3528
  %v3766 = vmax.f32 %v3266, %v3530
  %v3767 = vmax.f32 %v3267, %v3532
  %v3768 = vmax.f32 %v3268, %v3534
  %v3769 = vmax.f32 %v3269, %v3536
  %v3770 = vmax.f32 %v3270, %v3538
  %v3771 = vmax.f32 %v3271, %v3540
  %v3772 = vmax.f32 %v3272, %v3542
  %v3773 = vmax.f32 %v3273, %v3544
  %v3774 = vmax.f32 %v3274, %v3546
  %v3775 = vmax.f32 %v3275, %v3548
  %v3776 = vmax.f32 %v3276, %v3550
  %v3777 = vmax.f32 %v3277, %v3552
  %v3778 = vmax.f32 %v3278, %v3554
  %v3779 = vmax.f32 %v3279, %v3556
  %v3780 = vmax.f32 %v3280, %v3558
  %v3781 = vmax.f32 %v3281, %v3560
  %v3782 = vmax.f32 %v3282, %v3562
  %v3783 = vmax.f32 %v3283, %v3564
  %v3784 = vmax.f32 %v3284, %v3566
  %v3785 = vmax.f32 %v3285, %v3568
  %v3786 = vmax.f32 %v3286, %v3570
  %v3787 = vmax.f32 %v3287, %v3572
  %v3788 = vmax.f32 %v3288, %v3574
  %v3789 = vmax.f32 %v3289, %v3576
  %v3790 = vmax.f32 %v3290, %v3578
  %v3791 = vmax.f32 %v3291, %v3580
  %v3792 = vmax.f32 %v3292, %v3582
  %v3793 = vmax.f32 %v3293, %v3584
  %v3794 = vmax.f32 %v3294, %v3586
  %v3795 = vmax.f32 %v3295, %v3588
  %v3796 = vmax.f32 %v3296, %v3590
  %v3797 = vmax.f32 %v3297, %v3592
  %v3798 = vmax.f32 %v3298, %v3594
  %v3799 = vmax.f32 %v3299, %v3596
  %v3800 = vmax.f32 %v3300, %v3598
  %v3801 = vmax.f32 %v3301, %v3600
  %v3802 = vmax.f32 %v3302, %v3602
  %v3803 = vmax.f32 %v1869, %v3703
  %v3804 = vmax.f32 %v1870, %v3704
  %v3805 = vmax.f32 %v1871, %v3705
  %v3806 = vmax.f32 %v1872, %v3706
  %v3807 = vmax.f32 %v1873, %v3707
  %v3808 = vmax.f32 %v1874, %v3708
  %v3809 = vmax.f32 %v1875, %v3709
  %v3810 = vmax.f32 %v1876, %v3710
  %v3811 = vmax.f32 %v1877, %v3711
  %v3812 = vmax.f32 %v1878, %v3712
  %v3813 = vmax.f32 %v1879, %v3713
  %v3814 = vmax.f32 %v1880, %v3714
  %v3815 = vmax.f32 %v1881, %v3715
  %v3816 = vmax.f32 %v1882, %v3716
  %v3817 = vmax.f32 %v1883, %v3717
  %v3818 = vmax.f32 %v1884, %v3718
  %v3819 = vmax.f32 %v1885, %v3719
  %v3820 = vmax.f32 %v1886, %v3720
  %v3821 = vmax.f32 %v1887, %v3721
  %v3822 = vmax.f32 %v1888, %v3722
  %v3823 = vmax.f32 %v1889, %v3723
  %v3824 = vmax.f32 %v1890, %v3724
  %v3825 = vmax.f32 %v1891, %v3725
  %v3826 = vmax.f32 %v1892, %v3726
  %v3827 = vmax.f32 %v1893, %v3727
  %v3828 = vmax.f32 %v1894, %v3728
  %v3829 = vmax.f32 %v1895, %v3729
  %v3830 = vmax.f32 %v1896, %v3730
  %v3831 = vmax.f32 %v1897, %v3731
  %v3832 = vmax.f32 %v1898, %v3732
  %v3833 = vmax.f32 %v1899, %v3733
  %v3834 = vmax.f32 %v1900, %v3734
  %v3835 = vmax.f32 %v1901, %v3735
  %v3836 = vmax.f32 %v1902, %v3736
  %v3837 = vmax.f32 %v1903, %v3737
  %v3838 = vmax.f32 %v1904, %v3738
  %v3839 = vmax.f32 %v1905, %v3739
  %v3840 = vmax.f32 %v1906, %v3740
  %v3841 = vmax.f32 %v1907, %v3741
  %v3842 = vmax.f32 %v1908, %v3742
  %v3843 = vmax.f32 %v1909, %v3743
  %v3844 = vmax.f32 %v1910, %v3744
  %v3845 = vmax.f32 %v1911, %v3745
  %v3846 = vmax.f32 %v1912, %v3746
  %v3847 = vmax.f32 %v1913, %v3747
  %v3848 = vmax.f32 %v1914, %v3748
  %v3849 = vmax.f32 %v1915, %v3749
  %v3850 = vmax.f32 %v1916, %v3750
  %v3851 = vmax.f32 %v1917, %v3751
  %v3852 = vmax.f32 %v1918, %v3752
  %v3853 = vmax.f32 %v1919, %v3753
  %v3854 = vmax.f32 %v1920, %v3754
  %v3855 = vmax.f32 %v1921, %v3755
  %v3856 = vmax.f32 %v1922, %v3756
  %v3857 = vmax.f32 %v1923, %v3757
  %v3858 = vmax.f32 %v1924, %v3758
  %v3859 = vmax.f32 %v1925, %v3759
  %v3860 = vmax.f32 %v1926, %v3760
  %v3861 = vmax.f32 %v1927, %v3761
  %v3862 = vmax.f32 %v1928, %v3762
  %v3863 = vmax.f32 %v1929, %v3763
  %v3864 = vmax.f32 %v1930, %v3764
  %v3865 = vmax.f32 %v1931, %v3765
  %v3866 = vmax.f32 %v1932, %v3766
  %v3867 = vmax.f32 %v1933, %v3767
  %v3868 = vmax.f32 %v1934, %v3768
  %v3869 = vmax.f32 %v1935, %v3769
  %v3870 = vmax.f32 %v1936, %v3770
  %v3871 = vmax.f32 %v1937, %v3771
  %v3872 = vmax.f32 %v1938, %v3772
  %v3873 = vmax.f32 %v1939, %v3773
  %v3874 = vmax.f32 %v1940, %v3774
  %v3875 = vmax.f32 %v1941, %v3775
  %v3876 = vmax.f32 %v1942, %v3776
  %v3877 = vmax.f32 %v1943, %v3777
  %v3878 = vmax.f32 %v1944, %v3778
  %v3879 = vmax.f32 %v1945, %v3779
  %v3880 = vmax.f32 %v1946, %v3780
  %v3881 = vmax.f32 %v1947, %v3781
  %v3882 = vmax.f32 %v1948, %v3782
  %v3883 = vmax.f32 %v1949, %v3783
  %v3884 = vmax.f32 %v1950, %v3784
  %v3885 = vmax.f32 %v1951, %v3785
  %v3886 = vmax.f32 %v1952, %v3786
  %v3887 = vmax.f32 %v1953, %v3787
  %v3888 = vmax.f32 %v1954, %v3788
  %v3889 = vmax.f32 %v1955, %v3789
  %v3890 = vmax.f32 %v1956, %v3790
  %v3891 = vmax.f32 %v1957, %v3791
  %v3892 = vmax.f32 %v1958, %v3792
  %v3893 = vmax.f32 %v1959, %v3793
  %v3894 = vmax.f32 %v1960, %v3794
  %v3895 = vmax.f32 %v1961, %v3795
  %v3896 = vmax.f32 %v1962, %v3796
  %v3897 = vmax.f32 %v1963, %v3797
  %v3898 = vmax.f32 %v1964, %v3798
  %v3899 = vmax.f32 %v1965, %v3799
  %v3900 = vmax.f32 %v1966, %v3800
  %v3901 = vmax.f32 %v1967, %v3801
  %v3902 = vmax.f32 %v1968, %v3802
  %s3903 = scalar_lea.vmem %s0, 1600
  %v3904 = vld [vmem:[%s3903] sm:$0xff]
  %v3905 = vld [vmem:[%s3903 + $0x8] sm:$0xff]
  %v3906 = vld [vmem:[%s3903 + $0x10] sm:$0xff]
  %v3907 = vld [vmem:[%s3903 + $0x18] sm:$0xff]
  %v3908 = vld [vmem:[%s3903 + $0x20] sm:$0xff]
  %v3909 = vld [vmem:[%s3903 + $0x28] sm:$0xff]
  %v3910 = vld [vmem:[%s3903 + $0x30] sm:$0xff]
  %v3911 = vld [vmem:[%s3903 + $0x38] sm:$0xff]
  %v3912 = vld [vmem:[%s3903 + $0x40] sm:$0xff]
  %v3913 = vld [vmem:[%s3903 + $0x48] sm:$0xff]
  %v3914 = vld [vmem:[%s3903 + $0x50] sm:$0xff]
  %v3915 = vld [vmem:[%s3903 + $0x58] sm:$0xff]
  %v3916 = vld [vmem:[%s3903 + $0x60] sm:$0xff]
  %v3917 = vld [vmem:[%s3903 + $0x68] sm:$0xff]
  %v3918 = vld [vmem:[%s3903 + $0x70] sm:$0xff]
  %v3919 = vld [vmem:[%s3903 + $0x78] sm:$0xff]
  %v3920 = vld [vmem:[%s3903 + $0x80] sm:$0xff]
  %v3921 = vld [vmem:[%s3903 + $0x88] sm:$0xff]
  %v3922 = vld [vmem:[%s3903 + $0x90] sm:$0xff]
  %v3923 = vld [vmem:[%s3903 + $0x98] sm:$0xff]
  %v3924 = vld [vmem:[%s3903 + $0xa0] sm:$0xff]
  %v3925 = vld [vmem:[%s3903 + $0xa8] sm:$0xff]
  %v3926 = vld [vmem:[%s3903 + $0xb0] sm:$0xff]
  %v3927 = vld [vmem:[%s3903 + $0xb8] sm:$0xff]
  %v3928 = vld [vmem:[%s3903 + $0xc0] sm:$0xff]
  %v3929 = vld [vmem:[%s3903 + $0xc8] sm:$0xff]
  %v3930 = vld [vmem:[%s3903 + $0xd0] sm:$0xff]
  %v3931 = vld [vmem:[%s3903 + $0xd8] sm:$0xff]
  %v3932 = vld [vmem:[%s3903 + $0xe0] sm:$0xff]
  %v3933 = vld [vmem:[%s3903 + $0xe8] sm:$0xff]
  %v3934 = vld [vmem:[%s3903 + $0xf0] sm:$0xff]
  %v3935 = vld [vmem:[%s3903 + $0xf8] sm:$0xff]
  %v3936 = vld [vmem:[%s3903 + $0x100] sm:$0xff]
  %v3937 = vld [vmem:[%s3903 + $0x108] sm:$0xff]
  %v3938 = vld [vmem:[%s3903 + $0x110] sm:$0xff]
  %v3939 = vld [vmem:[%s3903 + $0x118] sm:$0xff]
  %v3940 = vld [vmem:[%s3903 + $0x120] sm:$0xff]
  %v3941 = vld [vmem:[%s3903 + $0x128] sm:$0xff]
  %v3942 = vld [vmem:[%s3903 + $0x130] sm:$0xff]
  %v3943 = vld [vmem:[%s3903 + $0x138] sm:$0xff]
  %v3944 = vld [vmem:[%s3903 + $0x140] sm:$0xff]
  %v3945 = vld [vmem:[%s3903 + $0x148] sm:$0xff]
  %v3946 = vld [vmem:[%s3903 + $0x150] sm:$0xff]
  %v3947 = vld [vmem:[%s3903 + $0x158] sm:$0xff]
  %v3948 = vld [vmem:[%s3903 + $0x160] sm:$0xff]
  %v3949 = vld [vmem:[%s3903 + $0x168] sm:$0xff]
  %v3950 = vld [vmem:[%s3903 + $0x170] sm:$0xff]
  %v3951 = vld [vmem:[%s3903 + $0x178] sm:$0xff]
  %v3952 = vld [vmem:[%s3903 + $0x180] sm:$0xff]
  %v3953 = vld [vmem:[%s3903 + $0x188] sm:$0xff]
  %v3954 = vld [vmem:[%s3903 + $0x190] sm:$0xff]
  %v3955 = vld [vmem:[%s3903 + $0x198] sm:$0xff]
  %v3956 = vld [vmem:[%s3903 + $0x1a0] sm:$0xff]
  %v3957 = vld [vmem:[%s3903 + $0x1a8] sm:$0xff]
  %v3958 = vld [vmem:[%s3903 + $0x1b0] sm:$0xff]
  %v3959 = vld [vmem:[%s3903 + $0x1b8] sm:$0xff]
  %v3960 = vld [vmem:[%s3903 + $0x1c0] sm:$0xff]
  %v3961 = vld [vmem:[%s3903 + $0x1c8] sm:$0xff]
  %v3962 = vld [vmem:[%s3903 + $0x1d0] sm:$0xff]
  %v3963 = vld [vmem:[%s3903 + $0x1d8] sm:$0xff]
  %v3964 = vld [vmem:[%s3903 + $0x1e0] sm:$0xff]
  %v3965 = vld [vmem:[%s3903 + $0x1e8] sm:$0xff]
  %v3966 = vld [vmem:[%s3903 + $0x1f0] sm:$0xff]
  %v3967 = vld [vmem:[%s3903 + $0x1f8] sm:$0xff]
  %v3968 = vld [vmem:[%s3903 + $0x200] sm:$0xff]
  %v3969 = vld [vmem:[%s3903 + $0x208] sm:$0xff]
  %v3970 = vld [vmem:[%s3903 + $0x210] sm:$0xff]
  %v3971 = vld [vmem:[%s3903 + $0x218] sm:$0xff]
  %v3972 = vld [vmem:[%s3903 + $0x220] sm:$0xff]
  %v3973 = vld [vmem:[%s3903 + $0x228] sm:$0xff]
  %v3974 = vld [vmem:[%s3903 + $0x230] sm:$0xff]
  %v3975 = vld [vmem:[%s3903 + $0x238] sm:$0xff]
  %v3976 = vld [vmem:[%s3903 + $0x240] sm:$0xff]
  %v3977 = vld [vmem:[%s3903 + $0x248] sm:$0xff]
  %v3978 = vld [vmem:[%s3903 + $0x250] sm:$0xff]
  %v3979 = vld [vmem:[%s3903 + $0x258] sm:$0xff]
  %v3980 = vld [vmem:[%s3903 + $0x260] sm:$0xff]
  %v3981 = vld [vmem:[%s3903 + $0x268] sm:$0xff]
  %v3982 = vld [vmem:[%s3903 + $0x270] sm:$0xff]
  %v3983 = vld [vmem:[%s3903 + $0x278] sm:$0xff]
  %v3984 = vld [vmem:[%s3903 + $0x280] sm:$0xff]
  %v3985 = vld [vmem:[%s3903 + $0x288] sm:$0xff]
  %v3986 = vld [vmem:[%s3903 + $0x290] sm:$0xff]
  %v3987 = vld [vmem:[%s3903 + $0x298] sm:$0xff]
  %v3988 = vld [vmem:[%s3903 + $0x2a0] sm:$0xff]
  %v3989 = vld [vmem:[%s3903 + $0x2a8] sm:$0xff]
  %v3990 = vld [vmem:[%s3903 + $0x2b0] sm:$0xff]
  %v3991 = vld [vmem:[%s3903 + $0x2b8] sm:$0xff]
  %v3992 = vld [vmem:[%s3903 + $0x2c0] sm:$0xff]
  %v3993 = vld [vmem:[%s3903 + $0x2c8] sm:$0xff]
  %v3994 = vld [vmem:[%s3903 + $0x2d0] sm:$0xff]
  %v3995 = vld [vmem:[%s3903 + $0x2d8] sm:$0xff]
  %v3996 = vld [vmem:[%s3903 + $0x2e0] sm:$0xff]
  %v3997 = vld [vmem:[%s3903 + $0x2e8] sm:$0xff]
  %v3998 = vld [vmem:[%s3903 + $0x2f0] sm:$0xff]
  %v3999 = vld [vmem:[%s3903 + $0x2f8] sm:$0xff]
  %v4000 = vld [vmem:[%s3903 + $0x300] sm:$0xff]
  %v4001 = vld [vmem:[%s3903 + $0x308] sm:$0xff]
  %v4002 = vld [vmem:[%s3903 + $0x310] sm:$0xff]
  %v4003 = vld [vmem:[%s3903 + $0x318] sm:$0xff]
  %v4104 = vunpack.c.l.b16 %v3904
  %v4105 = vunpack.c.h.b16 %v3904
  %v4106 = vunpack.c.l.b16 %v3905
  %v4107 = vunpack.c.h.b16 %v3905
  %v4108 = vunpack.c.l.b16 %v3906
  %v4109 = vunpack.c.h.b16 %v3906
  %v4110 = vunpack.c.l.b16 %v3907
  %v4111 = vunpack.c.h.b16 %v3907
  %v4112 = vunpack.c.l.b16 %v3908
  %v4113 = vunpack.c.h.b16 %v3908
  %v4114 = vunpack.c.l.b16 %v3909
  %v4115 = vunpack.c.h.b16 %v3909
  %v4116 = vunpack.c.l.b16 %v3910
  %v4117 = vunpack.c.h.b16 %v3910
  %v4118 = vunpack.c.l.b16 %v3911
  %v4119 = vunpack.c.h.b16 %v3911
  %v4120 = vunpack.c.l.b16 %v3912
  %v4121 = vunpack.c.h.b16 %v3912
  %v4122 = vunpack.c.l.b16 %v3913
  %v4123 = vunpack.c.h.b16 %v3913
  %v4124 = vunpack.c.l.b16 %v3914
  %v4125 = vunpack.c.h.b16 %v3914
  %v4126 = vunpack.c.l.b16 %v3915
  %v4127 = vunpack.c.h.b16 %v3915
  %v4128 = vunpack.c.l.b16 %v3916
  %v4129 = vunpack.c.h.b16 %v3916
  %v4130 = vunpack.c.l.b16 %v3917
  %v4131 = vunpack.c.h.b16 %v3917
  %v4132 = vunpack.c.l.b16 %v3918
  %v4133 = vunpack.c.h.b16 %v3918
  %v4134 = vunpack.c.l.b16 %v3919
  %v4135 = vunpack.c.h.b16 %v3919
  %v4136 = vunpack.c.l.b16 %v3920
  %v4137 = vunpack.c.h.b16 %v3920
  %v4138 = vunpack.c.l.b16 %v3921
  %v4139 = vunpack.c.h.b16 %v3921
  %v4140 = vunpack.c.l.b16 %v3922
  %v4141 = vunpack.c.h.b16 %v3922
  %v4142 = vunpack.c.l.b16 %v3923
  %v4143 = vunpack.c.h.b16 %v3923
  %v4144 = vunpack.c.l.b16 %v3924
  %v4145 = vunpack.c.h.b16 %v3924
  %v4146 = vunpack.c.l.b16 %v3925
  %v4147 = vunpack.c.h.b16 %v3925
  %v4148 = vunpack.c.l.b16 %v3926
  %v4149 = vunpack.c.h.b16 %v3926
  %v4150 = vunpack.c.l.b16 %v3927
  %v4151 = vunpack.c.h.b16 %v3927
  %v4152 = vunpack.c.l.b16 %v3928
  %v4153 = vunpack.c.h.b16 %v3928
  %v4154 = vunpack.c.l.b16 %v3929
  %v4155 = vunpack.c.h.b16 %v3929
  %v4156 = vunpack.c.l.b16 %v3930
  %v4157 = vunpack.c.h.b16 %v3930
  %v4158 = vunpack.c.l.b16 %v3931
  %v4159 = vunpack.c.h.b16 %v3931
  %v4160 = vunpack.c.l.b16 %v3932
  %v4161 = vunpack.c.h.b16 %v3932
  %v4162 = vunpack.c.l.b16 %v3933
  %v4163 = vunpack.c.h.b16 %v3933
  %v4164 = vunpack.c.l.b16 %v3934
  %v4165 = vunpack.c.h.b16 %v3934
  %v4166 = vunpack.c.l.b16 %v3935
  %v4167 = vunpack.c.h.b16 %v3935
  %v4168 = vunpack.c.l.b16 %v3936
  %v4169 = vunpack.c.h.b16 %v3936
  %v4170 = vunpack.c.l.b16 %v3937
  %v4171 = vunpack.c.h.b16 %v3937
  %v4172 = vunpack.c.l.b16 %v3938
  %v4173 = vunpack.c.h.b16 %v3938
  %v4174 = vunpack.c.l.b16 %v3939
  %v4175 = vunpack.c.h.b16 %v3939
  %v4176 = vunpack.c.l.b16 %v3940
  %v4177 = vunpack.c.h.b16 %v3940
  %v4178 = vunpack.c.l.b16 %v3941
  %v4179 = vunpack.c.h.b16 %v3941
  %v4180 = vunpack.c.l.b16 %v3942
  %v4181 = vunpack.c.h.b16 %v3942
  %v4182 = vunpack.c.l.b16 %v3943
  %v4183 = vunpack.c.h.b16 %v3943
  %v4184 = vunpack.c.l.b16 %v3944
  %v4185 = vunpack.c.h.b16 %v3944
  %v4186 = vunpack.c.l.b16 %v3945
  %v4187 = vunpack.c.h.b16 %v3945
  %v4188 = vunpack.c.l.b16 %v3946
  %v4189 = vunpack.c.h.b16 %v3946
  %v4190 = vunpack.c.l.b16 %v3947
  %v4191 = vunpack.c.h.b16 %v3947
  %v4192 = vunpack.c.l.b16 %v3948
  %v4193 = vunpack.c.h.b16 %v3948
  %v4194 = vunpack.c.l.b16 %v3949
  %v4195 = vunpack.c.h.b16 %v3949
  %v4196 = vunpack.c.l.b16 %v3950
  %v4197 = vunpack.c.h.b16 %v3950
  %v4198 = vunpack.c.l.b16 %v3951
  %v4199 = vunpack.c.h.b16 %v3951
  %v4200 = vunpack.c.l.b16 %v3952
  %v4201 = vunpack.c.h.b16 %v3952
  %v4202 = vunpack.c.l.b16 %v3953
  %v4203 = vunpack.c.h.b16 %v3953
  %v4204 = vunpack.c.l.b16 %v3954
  %v4205 = vunpack.c.h.b16 %v3954
  %v4206 = vunpack.c.l.b16 %v3955
  %v4207 = vunpack.c.h.b16 %v3955
  %v4208 = vunpack.c.l.b16 %v3956
  %v4209 = vunpack.c.h.b16 %v3956
  %v4210 = vunpack.c.l.b16 %v3957
  %v4211 = vunpack.c.h.b16 %v3957
  %v4212 = vunpack.c.l.b16 %v3958
  %v4213 = vunpack.c.h.b16 %v3958
  %v4214 = vunpack.c.l.b16 %v3959
  %v4215 = vunpack.c.h.b16 %v3959
  %v4216 = vunpack.c.l.b16 %v3960
  %v4217 = vunpack.c.h.b16 %v3960
  %v4218 = vunpack.c.l.b16 %v3961
  %v4219 = vunpack.c.h.b16 %v3961
  %v4220 = vunpack.c.l.b16 %v3962
  %v4221 = vunpack.c.h.b16 %v3962
  %v4222 = vunpack.c.l.b16 %v3963
  %v4223 = vunpack.c.h.b16 %v3963
  %v4224 = vunpack.c.l.b16 %v3964
  %v4225 = vunpack.c.h.b16 %v3964
  %v4226 = vunpack.c.l.b16 %v3965
  %v4227 = vunpack.c.h.b16 %v3965
  %v4228 = vunpack.c.l.b16 %v3966
  %v4229 = vunpack.c.h.b16 %v3966
  %v4230 = vunpack.c.l.b16 %v3967
  %v4231 = vunpack.c.h.b16 %v3967
  %v4232 = vunpack.c.l.b16 %v3968
  %v4233 = vunpack.c.h.b16 %v3968
  %v4234 = vunpack.c.l.b16 %v3969
  %v4235 = vunpack.c.h.b16 %v3969
  %v4236 = vunpack.c.l.b16 %v3970
  %v4237 = vunpack.c.h.b16 %v3970
  %v4238 = vunpack.c.l.b16 %v3971
  %v4239 = vunpack.c.h.b16 %v3971
  %v4240 = vunpack.c.l.b16 %v3972
  %v4241 = vunpack.c.h.b16 %v3972
  %v4242 = vunpack.c.l.b16 %v3973
  %v4243 = vunpack.c.h.b16 %v3973
  %v4244 = vunpack.c.l.b16 %v3974
  %v4245 = vunpack.c.h.b16 %v3974
  %v4246 = vunpack.c.l.b16 %v3975
  %v4247 = vunpack.c.h.b16 %v3975
  %v4248 = vunpack.c.l.b16 %v3976
  %v4249 = vunpack.c.h.b16 %v3976
  %v4250 = vunpack.c.l.b16 %v3977
  %v4251 = vunpack.c.h.b16 %v3977
  %v4252 = vunpack.c.l.b16 %v3978
  %v4253 = vunpack.c.h.b16 %v3978
  %v4254 = vunpack.c.l.b16 %v3979
  %v4255 = vunpack.c.h.b16 %v3979
  %v4256 = vunpack.c.l.b16 %v3980
  %v4257 = vunpack.c.h.b16 %v3980
  %v4258 = vunpack.c.l.b16 %v3981
  %v4259 = vunpack.c.h.b16 %v3981
  %v4260 = vunpack.c.l.b16 %v3982
  %v4261 = vunpack.c.h.b16 %v3982
  %v4262 = vunpack.c.l.b16 %v3983
  %v4263 = vunpack.c.h.b16 %v3983
  %v4264 = vunpack.c.l.b16 %v3984
  %v4265 = vunpack.c.h.b16 %v3984
  %v4266 = vunpack.c.l.b16 %v3985
  %v4267 = vunpack.c.h.b16 %v3985
  %v4268 = vunpack.c.l.b16 %v3986
  %v4269 = vunpack.c.h.b16 %v3986
  %v4270 = vunpack.c.l.b16 %v3987
  %v4271 = vunpack.c.h.b16 %v3987
  %v4272 = vunpack.c.l.b16 %v3988
  %v4273 = vunpack.c.h.b16 %v3988
  %v4274 = vunpack.c.l.b16 %v3989
  %v4275 = vunpack.c.h.b16 %v3989
  %v4276 = vunpack.c.l.b16 %v3990
  %v4277 = vunpack.c.h.b16 %v3990
  %v4278 = vunpack.c.l.b16 %v3991
  %v4279 = vunpack.c.h.b16 %v3991
  %v4280 = vunpack.c.l.b16 %v3992
  %v4281 = vunpack.c.h.b16 %v3992
  %v4282 = vunpack.c.l.b16 %v3993
  %v4283 = vunpack.c.h.b16 %v3993
  %v4284 = vunpack.c.l.b16 %v3994
  %v4285 = vunpack.c.h.b16 %v3994
  %v4286 = vunpack.c.l.b16 %v3995
  %v4287 = vunpack.c.h.b16 %v3995
  %v4288 = vunpack.c.l.b16 %v3996
  %v4289 = vunpack.c.h.b16 %v3996
  %v4290 = vunpack.c.l.b16 %v3997
  %v4291 = vunpack.c.h.b16 %v3997
  %v4292 = vunpack.c.l.b16 %v3998
  %v4293 = vunpack.c.h.b16 %v3998
  %v4294 = vunpack.c.l.b16 %v3999
  %v4295 = vunpack.c.h.b16 %v3999
  %v4296 = vunpack.c.l.b16 %v4000
  %v4297 = vunpack.c.h.b16 %v4000
  %v4298 = vunpack.c.l.b16 %v4001
  %v4299 = vunpack.c.h.b16 %v4001
  %v4300 = vunpack.c.l.b16 %v4002
  %v4301 = vunpack.c.h.b16 %v4002
  %v4302 = vunpack.c.l.b16 %v4003
  %v4303 = vunpack.c.h.b16 %v4003
  %v4304 = vpack.c.b16 %v4106, %v4104
  %v4305 = vpack.c.b16 %v4107, %v4105
  %v4306 = vpack.c.b16 %v4110, %v4108
  %v4307 = vpack.c.b16 %v4111, %v4109
  %v4308 = vpack.c.b16 %v4114, %v4112
  %v4309 = vpack.c.b16 %v4115, %v4113
  %v4310 = vpack.c.b16 %v4118, %v4116
  %v4311 = vpack.c.b16 %v4119, %v4117
  %v4312 = vpack.c.b16 %v4122, %v4120
  %v4313 = vpack.c.b16 %v4123, %v4121
  %v4314 = vpack.c.b16 %v4126, %v4124
  %v4315 = vpack.c.b16 %v4127, %v4125
  %v4316 = vpack.c.b16 %v4130, %v4128
  %v4317 = vpack.c.b16 %v4131, %v4129
  %v4318 = vpack.c.b16 %v4134, %v4132
  %v4319 = vpack.c.b16 %v4135, %v4133
  %v4320 = vpack.c.b16 %v4138, %v4136
  %v4321 = vpack.c.b16 %v4139, %v4137
  %v4322 = vpack.c.b16 %v4142, %v4140
  %v4323 = vpack.c.b16 %v4143, %v4141
  %v4324 = vpack.c.b16 %v4146, %v4144
  %v4325 = vpack.c.b16 %v4147, %v4145
  %v4326 = vpack.c.b16 %v4150, %v4148
  %v4327 = vpack.c.b16 %v4151, %v4149
  %v4328 = vpack.c.b16 %v4154, %v4152
  %v4329 = vpack.c.b16 %v4155, %v4153
  %v4330 = vpack.c.b16 %v4158, %v4156
  %v4331 = vpack.c.b16 %v4159, %v4157
  %v4332 = vpack.c.b16 %v4162, %v4160
  %v4333 = vpack.c.b16 %v4163, %v4161
  %v4334 = vpack.c.b16 %v4166, %v4164
  %v4335 = vpack.c.b16 %v4167, %v4165
  %v4336 = vpack.c.b16 %v4170, %v4168
  %v4337 = vpack.c.b16 %v4171, %v4169
  %v4338 = vpack.c.b16 %v4174, %v4172
  %v4339 = vpack.c.b16 %v4175, %v4173
  %v4340 = vpack.c.b16 %v4178, %v4176
  %v4341 = vpack.c.b16 %v4179, %v4177
  %v4342 = vpack.c.b16 %v4182, %v4180
  %v4343 = vpack.c.b16 %v4183, %v4181
  %v4344 = vpack.c.b16 %v4186, %v4184
  %v4345 = vpack.c.b16 %v4187, %v4185
  %v4346 = vpack.c.b16 %v4190, %v4188
  %v4347 = vpack.c.b16 %v4191, %v4189
  %v4348 = vpack.c.b16 %v4194, %v4192
  %v4349 = vpack.c.b16 %v4195, %v4193
  %v4350 = vpack.c.b16 %v4198, %v4196
  %v4351 = vpack.c.b16 %v4199, %v4197
  %v4352 = vpack.c.b16 %v4202, %v4200
  %v4353 = vpack.c.b16 %v4203, %v4201
  %v4354 = vpack.c.b16 %v4206, %v4204
  %v4355 = vpack.c.b16 %v4207, %v4205
  %v4356 = vpack.c.b16 %v4210, %v4208
  %v4357 = vpack.c.b16 %v4211, %v4209
  %v4358 = vpack.c.b16 %v4214, %v4212
  %v4359 = vpack.c.b16 %v4215, %v4213
  %v4360 = vpack.c.b16 %v4218, %v4216
  %v4361 = vpack.c.b16 %v4219, %v4217
  %v4362 = vpack.c.b16 %v4222, %v4220
  %v4363 = vpack.c.b16 %v4223, %v4221
  %v4364 = vpack.c.b16 %v4226, %v4224
  %v4365 = vpack.c.b16 %v4227, %v4225
  %v4366 = vpack.c.b16 %v4230, %v4228
  %v4367 = vpack.c.b16 %v4231, %v4229
  %v4368 = vpack.c.b16 %v4234, %v4232
  %v4369 = vpack.c.b16 %v4235, %v4233
  %v4370 = vpack.c.b16 %v4238, %v4236
  %v4371 = vpack.c.b16 %v4239, %v4237
  %v4372 = vpack.c.b16 %v4242, %v4240
  %v4373 = vpack.c.b16 %v4243, %v4241
  %v4374 = vpack.c.b16 %v4246, %v4244
  %v4375 = vpack.c.b16 %v4247, %v4245
  %v4376 = vpack.c.b16 %v4250, %v4248
  %v4377 = vpack.c.b16 %v4251, %v4249
  %v4378 = vpack.c.b16 %v4254, %v4252
  %v4379 = vpack.c.b16 %v4255, %v4253
  %v4380 = vpack.c.b16 %v4258, %v4256
  %v4381 = vpack.c.b16 %v4259, %v4257
  %v4382 = vpack.c.b16 %v4262, %v4260
  %v4383 = vpack.c.b16 %v4263, %v4261
  %v4384 = vpack.c.b16 %v4266, %v4264
  %v4385 = vpack.c.b16 %v4267, %v4265
  %v4386 = vpack.c.b16 %v4270, %v4268
  %v4387 = vpack.c.b16 %v4271, %v4269
  %v4388 = vpack.c.b16 %v4274, %v4272
  %v4389 = vpack.c.b16 %v4275, %v4273
  %v4390 = vpack.c.b16 %v4278, %v4276
  %v4391 = vpack.c.b16 %v4279, %v4277
  %v4392 = vpack.c.b16 %v4282, %v4280
  %v4393 = vpack.c.b16 %v4283, %v4281
  %v4394 = vpack.c.b16 %v4286, %v4284
  %v4395 = vpack.c.b16 %v4287, %v4285
  %v4396 = vpack.c.b16 %v4290, %v4288
  %v4397 = vpack.c.b16 %v4291, %v4289
  %v4398 = vpack.c.b16 %v4294, %v4292
  %v4399 = vpack.c.b16 %v4295, %v4293
  %v4400 = vpack.c.b16 %v4298, %v4296
  %v4401 = vpack.c.b16 %v4299, %v4297
  %v4402 = vpack.c.b16 %v4302, %v4300
  %v4403 = vpack.c.b16 %v4303, %v4301
  %v4455 = vsel %vm685, %v4305, 0
  %v4458 = vsel %vm685, %v4307, 0
  %v4461 = vsel %vm685, %v4309, 0
  %v4464 = vsel %vm685, %v4311, 0
  %v4467 = vsel %vm685, %v4313, 0
  %v4470 = vsel %vm685, %v4315, 0
  %v4473 = vsel %vm685, %v4317, 0
  %v4476 = vsel %vm685, %v4319, 0
  %v4479 = vsel %vm685, %v4321, 0
  %v4482 = vsel %vm685, %v4323, 0
  %v4485 = vsel %vm685, %v4325, 0
  %v4488 = vsel %vm685, %v4327, 0
  %v4491 = vsel %vm685, %v4329, 0
  %v4494 = vsel %vm685, %v4331, 0
  %v4497 = vsel %vm685, %v4333, 0
  %v4500 = vsel %vm685, %v4335, 0
  %v4503 = vsel %vm685, %v4337, 0
  %v4506 = vsel %vm685, %v4339, 0
  %v4509 = vsel %vm685, %v4341, 0
  %v4512 = vsel %vm685, %v4343, 0
  %v4515 = vsel %vm685, %v4345, 0
  %v4518 = vsel %vm685, %v4347, 0
  %v4521 = vsel %vm685, %v4349, 0
  %v4524 = vsel %vm685, %v4351, 0
  %v4527 = vsel %vm685, %v4353, 0
  %v4530 = vsel %vm685, %v4355, 0
  %v4533 = vsel %vm685, %v4357, 0
  %v4536 = vsel %vm685, %v4359, 0
  %v4539 = vsel %vm685, %v4361, 0
  %v4542 = vsel %vm685, %v4363, 0
  %v4545 = vsel %vm685, %v4365, 0
  %v4548 = vsel %vm685, %v4367, 0
  %v4551 = vsel %vm685, %v4369, 0
  %v4554 = vsel %vm685, %v4371, 0
  %v4557 = vsel %vm685, %v4373, 0
  %v4560 = vsel %vm685, %v4375, 0
  %v4563 = vsel %vm685, %v4377, 0
  %v4566 = vsel %vm685, %v4379, 0
  %v4569 = vsel %vm685, %v4381, 0
  %v4572 = vsel %vm685, %v4383, 0
  %v4575 = vsel %vm685, %v4385, 0
  %v4578 = vsel %vm685, %v4387, 0
  %v4581 = vsel %vm685, %v4389, 0
  %v4584 = vsel %vm685, %v4391, 0
  %v4587 = vsel %vm685, %v4393, 0
  %v4590 = vsel %vm685, %v4395, 0
  %v4593 = vsel %vm685, %v4397, 0
  %v4596 = vsel %vm685, %v4399, 0
  %v4599 = vsel %vm685, %v4401, 0
  %v4602 = vsel %vm685, %v4403, 0
  %4604 = vmatprep.subr.bf16.mxu0 %v650
  %4605 = vmatpush1.bf16.msra.mxu0 %v649
  %4606 = vmatprep.subr.bf16.mxu0 %v652
  %4607 = vmatpush1.bf16.msra.mxu0 %v651
  %4608 = vmatprep.subr.bf16.mxu0 %v654
  %4609 = vmatpush1.bf16.msra.mxu0 %v653
  %4610 = vmatprep.subr.bf16.mxu0 %v656
  %4611 = vmatpush1.bf16.msra.mxu0 %v655
  %4612 = vmatprep.subr.bf16.mxu0 %v658
  %4613 = vmatpush1.bf16.msra.mxu0 %v657
  %4614 = vmatprep.subr.bf16.mxu0 %v660
  %4615 = vmatpush1.bf16.msra.mxu0 %v659
  %4616 = vmatprep.subr.bf16.mxu0 %v662
  %4617 = vmatpush1.bf16.msra.mxu0 %v661
  %4618 = vmatprep.subr.bf16.mxu0 %v664
  %4619 = vmatpush1.bf16.msra.mxu0 %v663
  %4620 = vmatprep.subr.bf16.mxu0 %v666
  %4621 = vmatpush1.bf16.msra.mxu0 %v665
  %4622 = vmatprep.subr.bf16.mxu0 0
  %4623 = vmatpush1.bf16.msra.mxu0 0
  %4624 = vmatprep.subr.bf16.mxu0 0
  %4625 = vmatpush1.bf16.msra.mxu0 0
  %4626 = vmatprep.subr.bf16.mxu0 0
  %4627 = vmatpush1.bf16.msra.mxu0 0
  %4628 = vmatprep.subr.bf16.mxu0 0
  %4629 = vmatpush1.bf16.msra.mxu0 0
  %4630 = vmatprep.subr.bf16.mxu0 0
  %4631 = vmatpush1.bf16.msra.mxu0 0
  %4632 = vmatprep.subr.bf16.mxu0 0
  %4633 = vmatpush1.bf16.msra.mxu0 0
  %4634 = vmatprep.subr.bf16.mxu0 0
  %4635 = vmatpush1.bf16.msra.mxu0 0
  %4636 = vmatprep.mubr.bf16.mxu0 %v4455
  %4637 = vmatmul.mubr.bf16.gmra.mrb[0].mxu0 %v4304
  %v4638 = vpop.f32.mrb[0].mxu0
  %v4639 = vadd.f32 0.0, %v4638
  %v4640 = vpop.f32.mrb[0].mxu0
  %v4641 = vadd.f32 0.0, %v4640
  %v4642 = vpop.f32.mrb[0].mxu0
  %v4643 = vadd.f32 0.0, %v4642
  %v4644 = vpop.f32.mrb[0].mxu0
  %v4645 = vadd.f32 0.0, %v4644
  %4646 = vmatprep.mubr.bf16.mxu0 %v4458
  %4647 = vmatmul.mubr.bf16.gmra.mrb[0].mxu0 %v4306
  %v4648 = vpop.f32.mrb[0].mxu0
  %v4649 = vadd.f32 0.0, %v4648
  %v4650 = vpop.f32.mrb[0].mxu0
  %v4651 = vadd.f32 0.0, %v4650
  %v4652 = vpop.f32.mrb[0].mxu0
  %v4653 = vadd.f32 0.0, %v4652
  %v4654 = vpop.f32.mrb[0].mxu0
  %v4655 = vadd.f32 0.0, %v4654
  %4656 = vmatprep.mubr.bf16.mxu0 %v4461
  %4657 = vmatmul.mubr.bf16.gmra.mrb[0].mxu0 %v4308
  %v4658 = vpop.f32.mrb[0].mxu0
  %v4659 = vadd.f32 0.0, %v4658
  %v4660 = vpop.f32.mrb[0].mxu0
  %v4661 = vadd.f32 0.0, %v4660
  %v4662 = vpop.f32.mrb[0].mxu0
  %v4663 = vadd.f32 0.0, %v4662
  %v4664 = vpop.f32.mrb[0].mxu0
  %v4665 = vadd.f32 0.0, %v4664
  %4666 = vmatprep.mubr.bf16.mxu0 %v4464
  %4667 = vmatmul.mubr.bf16.gmra.mrb[0].mxu0 %v4310
  %v4668 = vpop.f32.mrb[0].mxu0
  %v4669 = vadd.f32 0.0, %v4668
  %v4670 = vpop.f32.mrb[0].mxu0
  %v4671 = vadd.f32 0.0, %v4670
  %v4672 = vpop.f32.mrb[0].mxu0
  %v4673 = vadd.f32 0.0, %v4672
  %v4674 = vpop.f32.mrb[0].mxu0
  %v4675 = vadd.f32 0.0, %v4674
  %4676 = vmatprep.mubr.bf16.mxu0 %v4467
  %4677 = vmatmul.mubr.bf16.gmra.mrb[0].mxu0 %v4312
  %v4678 = vpop.f32.mrb[0].mxu0
  %v4679 = vadd.f32 0.0, %v4678
  %v4680 = vpop.f32.mrb[0].mxu0
  %v4681 = vadd.f32 0.0, %v4680
  %v4682 = vpop.f32.mrb[0].mxu0
  %v4683 = vadd.f32 0.0, %v4682
  %v4684 = vpop.f32.mrb[0].mxu0
  %v4685 = vadd.f32 0.0, %v4684
  %4686 = vmatprep.mubr.bf16.mxu0 %v4470
  %4687 = vmatmul.mubr.bf16.gmra.mrb[0].mxu0 %v4314
  %v4688 = vpop.f32.mrb[0].mxu0
  %v4689 = vadd.f32 0.0, %v4688
  %v4690 = vpop.f32.mrb[0].mxu0
  %v4691 = vadd.f32 0.0, %v4690
  %v4692 = vpop.f32.mrb[0].mxu0
  %v4693 = vadd.f32 0.0, %v4692
  %v4694 = vpop.f32.mrb[0].mxu0
  %v4695 = vadd.f32 0.0, %v4694
  %4696 = vmatprep.mubr.bf16.mxu0 %v4473
  %4697 = vmatmul.mubr.bf16.gmra.mrb[0].mxu0 %v4316
  %v4698 = vpop.f32.mrb[0].mxu0
  %v4699 = vadd.f32 0.0, %v4698
  %v4700 = vpop.f32.mrb[0].mxu0
  %v4701 = vadd.f32 0.0, %v4700
  %v4702 = vpop.f32.mrb[0].mxu0
  %v4703 = vadd.f32 0.0, %v4702
  %v4704 = vpop.f32.mrb[0].mxu0
  %v4705 = vadd.f32 0.0, %v4704
  %4706 = vmatprep.mubr.bf16.mxu0 %v4476
  %4707 = vmatmul.mubr.bf16.gmra.mrb[0].mxu0 %v4318
  %v4708 = vpop.f32.mrb[0].mxu0
  %v4709 = vadd.f32 0.0, %v4708
  %v4710 = vpop.f32.mrb[0].mxu0
  %v4711 = vadd.f32 0.0, %v4710
  %v4712 = vpop.f32.mrb[0].mxu0
  %v4713 = vadd.f32 0.0, %v4712
  %v4714 = vpop.f32.mrb[0].mxu0
  %v4715 = vadd.f32 0.0, %v4714
  %4716 = vmatprep.mubr.bf16.mxu0 %v4479
  %4717 = vmatmul.mubr.bf16.gmra.mrb[0].mxu0 %v4320
  %v4718 = vpop.f32.mrb[0].mxu0
  %v4719 = vadd.f32 0.0, %v4718
  %v4720 = vpop.f32.mrb[0].mxu0
  %v4721 = vadd.f32 0.0, %v4720
  %v4722 = vpop.f32.mrb[0].mxu0
  %v4723 = vadd.f32 0.0, %v4722
  %v4724 = vpop.f32.mrb[0].mxu0
  %v4725 = vadd.f32 0.0, %v4724
  %4726 = vmatprep.mubr.bf16.mxu0 %v4482
  %4727 = vmatmul.mubr.bf16.gmra.mrb[0].mxu0 %v4322
  %v4728 = vpop.f32.mrb[0].mxu0
  %v4729 = vadd.f32 0.0, %v4728
  %v4730 = vpop.f32.mrb[0].mxu0
  %v4731 = vadd.f32 0.0, %v4730
  %v4732 = vpop.f32.mrb[0].mxu0
  %v4733 = vadd.f32 0.0, %v4732
  %v4734 = vpop.f32.mrb[0].mxu0
  %v4735 = vadd.f32 0.0, %v4734
  %4736 = vmatprep.mubr.bf16.mxu0 %v4485
  %4737 = vmatmul.mubr.bf16.gmra.mrb[0].mxu0 %v4324
  %v4738 = vpop.f32.mrb[0].mxu0
  %v4739 = vadd.f32 0.0, %v4738
  %v4740 = vpop.f32.mrb[0].mxu0
  %v4741 = vadd.f32 0.0, %v4740
  %v4742 = vpop.f32.mrb[0].mxu0
  %v4743 = vadd.f32 0.0, %v4742
  %v4744 = vpop.f32.mrb[0].mxu0
  %v4745 = vadd.f32 0.0, %v4744
  %4746 = vmatprep.mubr.bf16.mxu0 %v4488
  %4747 = vmatmul.mubr.bf16.gmra.mrb[0].mxu0 %v4326
  %v4748 = vpop.f32.mrb[0].mxu0
  %v4749 = vadd.f32 0.0, %v4748
  %v4750 = vpop.f32.mrb[0].mxu0
  %v4751 = vadd.f32 0.0, %v4750
  %v4752 = vpop.f32.mrb[0].mxu0
  %v4753 = vadd.f32 0.0, %v4752
  %v4754 = vpop.f32.mrb[0].mxu0
  %v4755 = vadd.f32 0.0, %v4754
  %4756 = vmatprep.mubr.bf16.mxu0 %v4491
  %4757 = vmatmul.mubr.bf16.gmra.mrb[0].mxu0 %v4328
  %v4758 = vpop.f32.mrb[0].mxu0
  %v4759 = vadd.f32 0.0, %v4758
  %v4760 = vpop.f32.mrb[0].mxu0
  %v4761 = vadd.f32 0.0, %v4760
  %v4762 = vpop.f32.mrb[0].mxu0
  %v4763 = vadd.f32 0.0, %v4762
  %v4764 = vpop.f32.mrb[0].mxu0
  %v4765 = vadd.f32 0.0, %v4764
  %4766 = vmatprep.mubr.bf16.mxu0 %v4494
  %4767 = vmatmul.mubr.bf16.gmra.mrb[0].mxu0 %v4330
  %v4768 = vpop.f32.mrb[0].mxu0
  %v4769 = vadd.f32 0.0, %v4768
  %v4770 = vpop.f32.mrb[0].mxu0
  %v4771 = vadd.f32 0.0, %v4770
  %v4772 = vpop.f32.mrb[0].mxu0
  %v4773 = vadd.f32 0.0, %v4772
  %v4774 = vpop.f32.mrb[0].mxu0
  %v4775 = vadd.f32 0.0, %v4774
  %4776 = vmatprep.mubr.bf16.mxu0 %v4497
  %4777 = vmatmul.mubr.bf16.gmra.mrb[0].mxu0 %v4332
  %v4778 = vpop.f32.mrb[0].mxu0
  %v4779 = vadd.f32 0.0, %v4778
  %v4780 = vpop.f32.mrb[0].mxu0
  %v4781 = vadd.f32 0.0, %v4780
  %v4782 = vpop.f32.mrb[0].mxu0
  %v4783 = vadd.f32 0.0, %v4782
  %v4784 = vpop.f32.mrb[0].mxu0
  %v4785 = vadd.f32 0.0, %v4784
  %4786 = vmatprep.mubr.bf16.mxu0 %v4500
  %4787 = vmatmul.mubr.bf16.gmra.mrb[0].mxu0 %v4334
  %v4788 = vpop.f32.mrb[0].mxu0
  %v4789 = vadd.f32 0.0, %v4788
  %v4790 = vpop.f32.mrb[0].mxu0
  %v4791 = vadd.f32 0.0, %v4790
  %v4792 = vpop.f32.mrb[0].mxu0
  %v4793 = vadd.f32 0.0, %v4792
  %v4794 = vpop.f32.mrb[0].mxu0
  %v4795 = vadd.f32 0.0, %v4794
  %4796 = vmatprep.mubr.bf16.mxu0 %v4503
  %4797 = vmatmul.mubr.bf16.gmra.mrb[0].mxu0 %v4336
  %v4798 = vpop.f32.mrb[0].mxu0
  %v4799 = vadd.f32 0.0, %v4798
  %v4800 = vpop.f32.mrb[0].mxu0
  %v4801 = vadd.f32 0.0, %v4800
  %v4802 = vpop.f32.mrb[0].mxu0
  %v4803 = vadd.f32 0.0, %v4802
  %v4804 = vpop.f32.mrb[0].mxu0
  %v4805 = vadd.f32 0.0, %v4804
  %4806 = vmatprep.mubr.bf16.mxu0 %v4506
  %4807 = vmatmul.mubr.bf16.gmra.mrb[0].mxu0 %v4338
  %v4808 = vpop.f32.mrb[0].mxu0
  %v4809 = vadd.f32 0.0, %v4808
  %v4810 = vpop.f32.mrb[0].mxu0
  %v4811 = vadd.f32 0.0, %v4810
  %v4812 = vpop.f32.mrb[0].mxu0
  %v4813 = vadd.f32 0.0, %v4812
  %v4814 = vpop.f32.mrb[0].mxu0
  %v4815 = vadd.f32 0.0, %v4814
  %4816 = vmatprep.mubr.bf16.mxu0 %v4509
  %4817 = vmatmul.mubr.bf16.gmra.mrb[0].mxu0 %v4340
  %v4818 = vpop.f32.mrb[0].mxu0
  %v4819 = vadd.f32 0.0, %v4818
  %v4820 = vpop.f32.mrb[0].mxu0
  %v4821 = vadd.f32 0.0, %v4820
  %v4822 = vpop.f32.mrb[0].mxu0
  %v4823 = vadd.f32 0.0, %v4822
  %v4824 = vpop.f32.mrb[0].mxu0
  %v4825 = vadd.f32 0.0, %v4824
  %4826 = vmatprep.mubr.bf16.mxu0 %v4512
  %4827 = vmatmul.mubr.bf16.gmra.mrb[0].mxu0 %v4342
  %v4828 = vpop.f32.mrb[0].mxu0
  %v4829 = vadd.f32 0.0, %v4828
  %v4830 = vpop.f32.mrb[0].mxu0
  %v4831 = vadd.f32 0.0, %v4830
  %v4832 = vpop.f32.mrb[0].mxu0
  %v4833 = vadd.f32 0.0, %v4832
  %v4834 = vpop.f32.mrb[0].mxu0
  %v4835 = vadd.f32 0.0, %v4834
  %4836 = vmatprep.mubr.bf16.mxu0 %v4515
  %4837 = vmatmul.mubr.bf16.gmra.mrb[0].mxu0 %v4344
  %v4838 = vpop.f32.mrb[0].mxu0
  %v4839 = vadd.f32 0.0, %v4838
  %v4840 = vpop.f32.mrb[0].mxu0
  %v4841 = vadd.f32 0.0, %v4840
  %v4842 = vpop.f32.mrb[0].mxu0
  %v4843 = vadd.f32 0.0, %v4842
  %v4844 = vpop.f32.mrb[0].mxu0
  %v4845 = vadd.f32 0.0, %v4844
  %4846 = vmatprep.mubr.bf16.mxu0 %v4518
  %4847 = vmatmul.mubr.bf16.gmra.mrb[0].mxu0 %v4346
  %v4848 = vpop.f32.mrb[0].mxu0
  %v4849 = vadd.f32 0.0, %v4848
  %v4850 = vpop.f32.mrb[0].mxu0
  %v4851 = vadd.f32 0.0, %v4850
  %v4852 = vpop.f32.mrb[0].mxu0
  %v4853 = vadd.f32 0.0, %v4852
  %v4854 = vpop.f32.mrb[0].mxu0
  %v4855 = vadd.f32 0.0, %v4854
  %4856 = vmatprep.mubr.bf16.mxu0 %v4521
  %4857 = vmatmul.mubr.bf16.gmra.mrb[0].mxu0 %v4348
  %v4858 = vpop.f32.mrb[0].mxu0
  %v4859 = vadd.f32 0.0, %v4858
  %v4860 = vpop.f32.mrb[0].mxu0
  %v4861 = vadd.f32 0.0, %v4860
  %v4862 = vpop.f32.mrb[0].mxu0
  %v4863 = vadd.f32 0.0, %v4862
  %v4864 = vpop.f32.mrb[0].mxu0
  %v4865 = vadd.f32 0.0, %v4864
  %4866 = vmatprep.mubr.bf16.mxu0 %v4524
  %4867 = vmatmul.mubr.bf16.gmra.mrb[0].mxu0 %v4350
  %v4868 = vpop.f32.mrb[0].mxu0
  %v4869 = vadd.f32 0.0, %v4868
  %v4870 = vpop.f32.mrb[0].mxu0
  %v4871 = vadd.f32 0.0, %v4870
  %v4872 = vpop.f32.mrb[0].mxu0
  %v4873 = vadd.f32 0.0, %v4872
  %v4874 = vpop.f32.mrb[0].mxu0
  %v4875 = vadd.f32 0.0, %v4874
  %4876 = vmatprep.mubr.bf16.mxu0 %v4527
  %4877 = vmatmul.mubr.bf16.gmra.mrb[0].mxu0 %v4352
  %v4878 = vpop.f32.mrb[0].mxu0
  %v4879 = vadd.f32 0.0, %v4878
  %v4880 = vpop.f32.mrb[0].mxu0
  %v4881 = vadd.f32 0.0, %v4880
  %v4882 = vpop.f32.mrb[0].mxu0
  %v4883 = vadd.f32 0.0, %v4882
  %v4884 = vpop.f32.mrb[0].mxu0
  %v4885 = vadd.f32 0.0, %v4884
  %4886 = vmatprep.mubr.bf16.mxu0 %v4530
  %4887 = vmatmul.mubr.bf16.gmra.mrb[0].mxu0 %v4354
  %v4888 = vpop.f32.mrb[0].mxu0
  %v4889 = vadd.f32 0.0, %v4888
  %v4890 = vpop.f32.mrb[0].mxu0
  %v4891 = vadd.f32 0.0, %v4890
  %v4892 = vpop.f32.mrb[0].mxu0
  %v4893 = vadd.f32 0.0, %v4892
  %v4894 = vpop.f32.mrb[0].mxu0
  %v4895 = vadd.f32 0.0, %v4894
  %4896 = vmatprep.mubr.bf16.mxu0 %v4533
  %4897 = vmatmul.mubr.bf16.gmra.mrb[0].mxu0 %v4356
  %v4898 = vpop.f32.mrb[0].mxu0
  %v4899 = vadd.f32 0.0, %v4898
  %v4900 = vpop.f32.mrb[0].mxu0
  %v4901 = vadd.f32 0.0, %v4900
  %v4902 = vpop.f32.mrb[0].mxu0
  %v4903 = vadd.f32 0.0, %v4902
  %v4904 = vpop.f32.mrb[0].mxu0
  %v4905 = vadd.f32 0.0, %v4904
  %4906 = vmatprep.mubr.bf16.mxu0 %v4536
  %4907 = vmatmul.mubr.bf16.gmra.mrb[0].mxu0 %v4358
  %v4908 = vpop.f32.mrb[0].mxu0
  %v4909 = vadd.f32 0.0, %v4908
  %v4910 = vpop.f32.mrb[0].mxu0
  %v4911 = vadd.f32 0.0, %v4910
  %v4912 = vpop.f32.mrb[0].mxu0
  %v4913 = vadd.f32 0.0, %v4912
  %v4914 = vpop.f32.mrb[0].mxu0
  %v4915 = vadd.f32 0.0, %v4914
  %4916 = vmatprep.mubr.bf16.mxu0 %v4539
  %4917 = vmatmul.mubr.bf16.gmra.mrb[0].mxu0 %v4360
  %v4918 = vpop.f32.mrb[0].mxu0
  %v4919 = vadd.f32 0.0, %v4918
  %v4920 = vpop.f32.mrb[0].mxu0
  %v4921 = vadd.f32 0.0, %v4920
  %v4922 = vpop.f32.mrb[0].mxu0
  %v4923 = vadd.f32 0.0, %v4922
  %v4924 = vpop.f32.mrb[0].mxu0
  %v4925 = vadd.f32 0.0, %v4924
  %4926 = vmatprep.mubr.bf16.mxu0 %v4542
  %4927 = vmatmul.mubr.bf16.gmra.mrb[0].mxu0 %v4362
  %v4928 = vpop.f32.mrb[0].mxu0
  %v4929 = vadd.f32 0.0, %v4928
  %v4930 = vpop.f32.mrb[0].mxu0
  %v4931 = vadd.f32 0.0, %v4930
  %v4932 = vpop.f32.mrb[0].mxu0
  %v4933 = vadd.f32 0.0, %v4932
  %v4934 = vpop.f32.mrb[0].mxu0
  %v4935 = vadd.f32 0.0, %v4934
  %4936 = vmatprep.mubr.bf16.mxu0 %v4545
  %4937 = vmatmul.mubr.bf16.gmra.mrb[0].mxu0 %v4364
  %v4938 = vpop.f32.mrb[0].mxu0
  %v4939 = vadd.f32 0.0, %v4938
  %v4940 = vpop.f32.mrb[0].mxu0
  %v4941 = vadd.f32 0.0, %v4940
  %v4942 = vpop.f32.mrb[0].mxu0
  %v4943 = vadd.f32 0.0, %v4942
  %v4944 = vpop.f32.mrb[0].mxu0
  %v4945 = vadd.f32 0.0, %v4944
  %4946 = vmatprep.mubr.bf16.mxu0 %v4548
  %4947 = vmatmul.mubr.bf16.gmra.mrb[0].mxu0 %v4366
  %v4948 = vpop.f32.mrb[0].mxu0
  %v4949 = vadd.f32 0.0, %v4948
  %v4950 = vpop.f32.mrb[0].mxu0
  %v4951 = vadd.f32 0.0, %v4950
  %v4952 = vpop.f32.mrb[0].mxu0
  %v4953 = vadd.f32 0.0, %v4952
  %v4954 = vpop.f32.mrb[0].mxu0
  %v4955 = vadd.f32 0.0, %v4954
  %4956 = vmatprep.mubr.bf16.mxu0 %v4551
  %4957 = vmatmul.mubr.bf16.gmra.mrb[0].mxu0 %v4368
  %v4958 = vpop.f32.mrb[0].mxu0
  %v4959 = vadd.f32 0.0, %v4958
  %v4960 = vpop.f32.mrb[0].mxu0
  %v4961 = vadd.f32 0.0, %v4960
  %v4962 = vpop.f32.mrb[0].mxu0
  %v4963 = vadd.f32 0.0, %v4962
  %v4964 = vpop.f32.mrb[0].mxu0
  %v4965 = vadd.f32 0.0, %v4964
  %4966 = vmatprep.mubr.bf16.mxu0 %v4554
  %4967 = vmatmul.mubr.bf16.gmra.mrb[0].mxu0 %v4370
  %v4968 = vpop.f32.mrb[0].mxu0
  %v4969 = vadd.f32 0.0, %v4968
  %v4970 = vpop.f32.mrb[0].mxu0
  %v4971 = vadd.f32 0.0, %v4970
  %v4972 = vpop.f32.mrb[0].mxu0
  %v4973 = vadd.f32 0.0, %v4972
  %v4974 = vpop.f32.mrb[0].mxu0
  %v4975 = vadd.f32 0.0, %v4974
  %4976 = vmatprep.mubr.bf16.mxu0 %v4557
  %4977 = vmatmul.mubr.bf16.gmra.mrb[0].mxu0 %v4372
  %v4978 = vpop.f32.mrb[0].mxu0
  %v4979 = vadd.f32 0.0, %v4978
  %v4980 = vpop.f32.mrb[0].mxu0
  %v4981 = vadd.f32 0.0, %v4980
  %v4982 = vpop.f32.mrb[0].mxu0
  %v4983 = vadd.f32 0.0, %v4982
  %v4984 = vpop.f32.mrb[0].mxu0
  %v4985 = vadd.f32 0.0, %v4984
  %4986 = vmatprep.mubr.bf16.mxu0 %v4560
  %4987 = vmatmul.mubr.bf16.gmra.mrb[0].mxu0 %v4374
  %v4988 = vpop.f32.mrb[0].mxu0
  %v4989 = vadd.f32 0.0, %v4988
  %v4990 = vpop.f32.mrb[0].mxu0
  %v4991 = vadd.f32 0.0, %v4990
  %v4992 = vpop.f32.mrb[0].mxu0
  %v4993 = vadd.f32 0.0, %v4992
  %v4994 = vpop.f32.mrb[0].mxu0
  %v4995 = vadd.f32 0.0, %v4994
  %4996 = vmatprep.mubr.bf16.mxu0 %v4563
  %4997 = vmatmul.mubr.bf16.gmra.mrb[0].mxu0 %v4376
  %v4998 = vpop.f32.mrb[0].mxu0
  %v4999 = vadd.f32 0.0, %v4998
  %v5000 = vpop.f32.mrb[0].mxu0
  %v5001 = vadd.f32 0.0, %v5000
  %v5002 = vpop.f32.mrb[0].mxu0
  %v5003 = vadd.f32 0.0, %v5002
  %v5004 = vpop.f32.mrb[0].mxu0
  %v5005 = vadd.f32 0.0, %v5004
  %5006 = vmatprep.mubr.bf16.mxu0 %v4566
  %5007 = vmatmul.mubr.bf16.gmra.mrb[0].mxu0 %v4378
  %v5008 = vpop.f32.mrb[0].mxu0
  %v5009 = vadd.f32 0.0, %v5008
  %v5010 = vpop.f32.mrb[0].mxu0
  %v5011 = vadd.f32 0.0, %v5010
  %v5012 = vpop.f32.mrb[0].mxu0
  %v5013 = vadd.f32 0.0, %v5012
  %v5014 = vpop.f32.mrb[0].mxu0
  %v5015 = vadd.f32 0.0, %v5014
  %5016 = vmatprep.mubr.bf16.mxu0 %v4569
  %5017 = vmatmul.mubr.bf16.gmra.mrb[0].mxu0 %v4380
  %v5018 = vpop.f32.mrb[0].mxu0
  %v5019 = vadd.f32 0.0, %v5018
  %v5020 = vpop.f32.mrb[0].mxu0
  %v5021 = vadd.f32 0.0, %v5020
  %v5022 = vpop.f32.mrb[0].mxu0
  %v5023 = vadd.f32 0.0, %v5022
  %v5024 = vpop.f32.mrb[0].mxu0
  %v5025 = vadd.f32 0.0, %v5024
  %5026 = vmatprep.mubr.bf16.mxu0 %v4572
  %5027 = vmatmul.mubr.bf16.gmra.mrb[0].mxu0 %v4382
  %v5028 = vpop.f32.mrb[0].mxu0
  %v5029 = vadd.f32 0.0, %v5028
  %v5030 = vpop.f32.mrb[0].mxu0
  %v5031 = vadd.f32 0.0, %v5030
  %v5032 = vpop.f32.mrb[0].mxu0
  %v5033 = vadd.f32 0.0, %v5032
  %v5034 = vpop.f32.mrb[0].mxu0
  %v5035 = vadd.f32 0.0, %v5034
  %5036 = vmatprep.mubr.bf16.mxu0 %v4575
  %5037 = vmatmul.mubr.bf16.gmra.mrb[0].mxu0 %v4384
  %v5038 = vpop.f32.mrb[0].mxu0
  %v5039 = vadd.f32 0.0, %v5038
  %v5040 = vpop.f32.mrb[0].mxu0
  %v5041 = vadd.f32 0.0, %v5040
  %v5042 = vpop.f32.mrb[0].mxu0
  %v5043 = vadd.f32 0.0, %v5042
  %v5044 = vpop.f32.mrb[0].mxu0
  %v5045 = vadd.f32 0.0, %v5044
  %5046 = vmatprep.mubr.bf16.mxu0 %v4578
  %5047 = vmatmul.mubr.bf16.gmra.mrb[0].mxu0 %v4386
  %v5048 = vpop.f32.mrb[0].mxu0
  %v5049 = vadd.f32 0.0, %v5048
  %v5050 = vpop.f32.mrb[0].mxu0
  %v5051 = vadd.f32 0.0, %v5050
  %v5052 = vpop.f32.mrb[0].mxu0
  %v5053 = vadd.f32 0.0, %v5052
  %v5054 = vpop.f32.mrb[0].mxu0
  %v5055 = vadd.f32 0.0, %v5054
  %5056 = vmatprep.mubr.bf16.mxu0 %v4581
  %5057 = vmatmul.mubr.bf16.gmra.mrb[0].mxu0 %v4388
  %v5058 = vpop.f32.mrb[0].mxu0
  %v5059 = vadd.f32 0.0, %v5058
  %v5060 = vpop.f32.mrb[0].mxu0
  %v5061 = vadd.f32 0.0, %v5060
  %v5062 = vpop.f32.mrb[0].mxu0
  %v5063 = vadd.f32 0.0, %v5062
  %v5064 = vpop.f32.mrb[0].mxu0
  %v5065 = vadd.f32 0.0, %v5064
  %5066 = vmatprep.mubr.bf16.mxu0 %v4584
  %5067 = vmatmul.mubr.bf16.gmra.mrb[0].mxu0 %v4390
  %v5068 = vpop.f32.mrb[0].mxu0
  %v5069 = vadd.f32 0.0, %v5068
  %v5070 = vpop.f32.mrb[0].mxu0
  %v5071 = vadd.f32 0.0, %v5070
  %v5072 = vpop.f32.mrb[0].mxu0
  %v5073 = vadd.f32 0.0, %v5072
  %v5074 = vpop.f32.mrb[0].mxu0
  %v5075 = vadd.f32 0.0, %v5074
  %5076 = vmatprep.mubr.bf16.mxu0 %v4587
  %5077 = vmatmul.mubr.bf16.gmra.mrb[0].mxu0 %v4392
  %v5078 = vpop.f32.mrb[0].mxu0
  %v5079 = vadd.f32 0.0, %v5078
  %v5080 = vpop.f32.mrb[0].mxu0
  %v5081 = vadd.f32 0.0, %v5080
  %v5082 = vpop.f32.mrb[0].mxu0
  %v5083 = vadd.f32 0.0, %v5082
  %v5084 = vpop.f32.mrb[0].mxu0
  %v5085 = vadd.f32 0.0, %v5084
  %5086 = vmatprep.mubr.bf16.mxu0 %v4590
  %5087 = vmatmul.mubr.bf16.gmra.mrb[0].mxu0 %v4394
  %v5088 = vpop.f32.mrb[0].mxu0
  %v5089 = vadd.f32 0.0, %v5088
  %v5090 = vpop.f32.mrb[0].mxu0
  %v5091 = vadd.f32 0.0, %v5090
  %v5092 = vpop.f32.mrb[0].mxu0
  %v5093 = vadd.f32 0.0, %v5092
  %v5094 = vpop.f32.mrb[0].mxu0
  %v5095 = vadd.f32 0.0, %v5094
  %5096 = vmatprep.mubr.bf16.mxu0 %v4593
  %5097 = vmatmul.mubr.bf16.gmra.mrb[0].mxu0 %v4396
  %v5098 = vpop.f32.mrb[0].mxu0
  %v5099 = vadd.f32 0.0, %v5098
  %v5100 = vpop.f32.mrb[0].mxu0
  %v5101 = vadd.f32 0.0, %v5100
  %v5102 = vpop.f32.mrb[0].mxu0
  %v5103 = vadd.f32 0.0, %v5102
  %v5104 = vpop.f32.mrb[0].mxu0
  %v5105 = vadd.f32 0.0, %v5104
  %5106 = vmatprep.mubr.bf16.mxu0 %v4596
  %5107 = vmatmul.mubr.bf16.gmra.mrb[0].mxu0 %v4398
  %v5108 = vpop.f32.mrb[0].mxu0
  %v5109 = vadd.f32 0.0, %v5108
  %v5110 = vpop.f32.mrb[0].mxu0
  %v5111 = vadd.f32 0.0, %v5110
  %v5112 = vpop.f32.mrb[0].mxu0
  %v5113 = vadd.f32 0.0, %v5112
  %v5114 = vpop.f32.mrb[0].mxu0
  %v5115 = vadd.f32 0.0, %v5114
  %5116 = vmatprep.mubr.bf16.mxu0 %v4599
  %5117 = vmatmul.mubr.bf16.gmra.mrb[0].mxu0 %v4400
  %v5118 = vpop.f32.mrb[0].mxu0
  %v5119 = vadd.f32 0.0, %v5118
  %v5120 = vpop.f32.mrb[0].mxu0
  %v5121 = vadd.f32 0.0, %v5120
  %v5122 = vpop.f32.mrb[0].mxu0
  %v5123 = vadd.f32 0.0, %v5122
  %v5124 = vpop.f32.mrb[0].mxu0
  %v5125 = vadd.f32 0.0, %v5124
  %5126 = vmatprep.mubr.bf16.mxu0 %v4602
  %5127 = vmatmul.mubr.bf16.gmra.mrb[0].mxu0 %v4402
  %v5128 = vpop.f32.mrb[0].mxu0
  %v5129 = vadd.f32 0.0, %v5128
  %v5130 = vpop.f32.mrb[0].mxu0
  %v5131 = vadd.f32 0.0, %v5130
  %v5132 = vpop.f32.mrb[0].mxu0
  %v5133 = vadd.f32 0.0, %v5132
  %v5134 = vpop.f32.mrb[0].mxu0
  %v5135 = vadd.f32 0.0, %v5134
  %5136 = vdwg.mxu0
  %v5137 = vmax.f32 %v4639, %v4641
  %v5138 = vmax.f32 %v4643, %v4645
  %v5139 = vmax.f32 %v4649, %v4651
  %v5140 = vmax.f32 %v4653, %v4655
  %v5141 = vmax.f32 %v4659, %v4661
  %v5142 = vmax.f32 %v4663, %v4665
  %v5143 = vmax.f32 %v4669, %v4671
  %v5144 = vmax.f32 %v4673, %v4675
  %v5145 = vmax.f32 %v4679, %v4681
  %v5146 = vmax.f32 %v4683, %v4685
  %v5147 = vmax.f32 %v4689, %v4691
  %v5148 = vmax.f32 %v4693, %v4695
  %v5149 = vmax.f32 %v4699, %v4701
  %v5150 = vmax.f32 %v4703, %v4705
  %v5151 = vmax.f32 %v4709, %v4711
  %v5152 = vmax.f32 %v4713, %v4715
  %v5153 = vmax.f32 %v4719, %v4721
  %v5154 = vmax.f32 %v4723, %v4725
  %v5155 = vmax.f32 %v4729, %v4731
  %v5156 = vmax.f32 %v4733, %v4735
  %v5157 = vmax.f32 %v4739, %v4741
  %v5158 = vmax.f32 %v4743, %v4745
  %v5159 = vmax.f32 %v4749, %v4751
  %v5160 = vmax.f32 %v4753, %v4755
  %v5161 = vmax.f32 %v4759, %v4761
  %v5162 = vmax.f32 %v4763, %v4765
  %v5163 = vmax.f32 %v4769, %v4771
  %v5164 = vmax.f32 %v4773, %v4775
  %v5165 = vmax.f32 %v4779, %v4781
  %v5166 = vmax.f32 %v4783, %v4785
  %v5167 = vmax.f32 %v4789, %v4791
  %v5168 = vmax.f32 %v4793, %v4795
  %v5169 = vmax.f32 %v4799, %v4801
  %v5170 = vmax.f32 %v4803, %v4805
  %v5171 = vmax.f32 %v4809, %v4811
  %v5172 = vmax.f32 %v4813, %v4815
  %v5173 = vmax.f32 %v4819, %v4821
  %v5174 = vmax.f32 %v4823, %v4825
  %v5175 = vmax.f32 %v4829, %v4831
  %v5176 = vmax.f32 %v4833, %v4835
  %v5177 = vmax.f32 %v4839, %v4841
  %v5178 = vmax.f32 %v4843, %v4845
  %v5179 = vmax.f32 %v4849, %v4851
  %v5180 = vmax.f32 %v4853, %v4855
  %v5181 = vmax.f32 %v4859, %v4861
  %v5182 = vmax.f32 %v4863, %v4865
  %v5183 = vmax.f32 %v4869, %v4871
  %v5184 = vmax.f32 %v4873, %v4875
  %v5185 = vmax.f32 %v4879, %v4881
  %v5186 = vmax.f32 %v4883, %v4885
  %v5187 = vmax.f32 %v4889, %v4891
  %v5188 = vmax.f32 %v4893, %v4895
  %v5189 = vmax.f32 %v4899, %v4901
  %v5190 = vmax.f32 %v4903, %v4905
  %v5191 = vmax.f32 %v4909, %v4911
  %v5192 = vmax.f32 %v4913, %v4915
  %v5193 = vmax.f32 %v4919, %v4921
  %v5194 = vmax.f32 %v4923, %v4925
  %v5195 = vmax.f32 %v4929, %v4931
  %v5196 = vmax.f32 %v4933, %v4935
  %v5197 = vmax.f32 %v4939, %v4941
  %v5198 = vmax.f32 %v4943, %v4945
  %v5199 = vmax.f32 %v4949, %v4951
  %v5200 = vmax.f32 %v4953, %v4955
  %v5201 = vmax.f32 %v4959, %v4961
  %v5202 = vmax.f32 %v4963, %v4965
  %v5203 = vmax.f32 %v4969, %v4971
  %v5204 = vmax.f32 %v4973, %v4975
  %v5205 = vmax.f32 %v4979, %v4981
  %v5206 = vmax.f32 %v4983, %v4985
  %v5207 = vmax.f32 %v4989, %v4991
  %v5208 = vmax.f32 %v4993, %v4995
  %v5209 = vmax.f32 %v4999, %v5001
  %v5210 = vmax.f32 %v5003, %v5005
  %v5211 = vmax.f32 %v5009, %v5011
  %v5212 = vmax.f32 %v5013, %v5015
  %v5213 = vmax.f32 %v5019, %v5021
  %v5214 = vmax.f32 %v5023, %v5025
  %v5215 = vmax.f32 %v5029, %v5031
  %v5216 = vmax.f32 %v5033, %v5035
  %v5217 = vmax.f32 %v5039, %v5041
  %v5218 = vmax.f32 %v5043, %v5045
  %v5219 = vmax.f32 %v5049, %v5051
  %v5220 = vmax.f32 %v5053, %v5055
  %v5221 = vmax.f32 %v5059, %v5061
  %v5222 = vmax.f32 %v5063, %v5065
  %v5223 = vmax.f32 %v5069, %v5071
  %v5224 = vmax.f32 %v5073, %v5075
  %v5225 = vmax.f32 %v5079, %v5081
  %v5226 = vmax.f32 %v5083, %v5085
  %v5227 = vmax.f32 %v5089, %v5091
  %v5228 = vmax.f32 %v5093, %v5095
  %v5229 = vmax.f32 %v5099, %v5101
  %v5230 = vmax.f32 %v5103, %v5105
  %v5231 = vmax.f32 %v5109, %v5111
  %v5232 = vmax.f32 %v5113, %v5115
  %v5233 = vmax.f32 %v5119, %v5121
  %v5234 = vmax.f32 %v5123, %v5125
  %v5235 = vmax.f32 %v5129, %v5131
  %v5236 = vmax.f32 %v5133, %v5135
  %5337 = vrot.lane.b32.xlu0 %v5137, 64
  %v5338 = vpop.permute.xlu0 %5337
  %5339 = vrot.lane.b32.xlu0 %v5138, 64
  %v5340 = vpop.permute.xlu0 %5339
  %5341 = vrot.lane.b32.xlu0 %v5139, 64
  %v5342 = vpop.permute.xlu0 %5341
  %5343 = vrot.lane.b32.xlu0 %v5140, 64
  %v5344 = vpop.permute.xlu0 %5343
  %5345 = vrot.lane.b32.xlu0 %v5141, 64
  %v5346 = vpop.permute.xlu0 %5345
  %5347 = vrot.lane.b32.xlu0 %v5142, 64
  %v5348 = vpop.permute.xlu0 %5347
  %5349 = vrot.lane.b32.xlu0 %v5143, 64
  %v5350 = vpop.permute.xlu0 %5349
  %5351 = vrot.lane.b32.xlu0 %v5144, 64
  %v5352 = vpop.permute.xlu0 %5351
  %5353 = vrot.lane.b32.xlu0 %v5145, 64
  %v5354 = vpop.permute.xlu0 %5353
  %5355 = vrot.lane.b32.xlu0 %v5146, 64
  %v5356 = vpop.permute.xlu0 %5355
  %5357 = vrot.lane.b32.xlu0 %v5147, 64
  %v5358 = vpop.permute.xlu0 %5357
  %5359 = vrot.lane.b32.xlu0 %v5148, 64
  %v5360 = vpop.permute.xlu0 %5359
  %5361 = vrot.lane.b32.xlu0 %v5149, 64
  %v5362 = vpop.permute.xlu0 %5361
  %5363 = vrot.lane.b32.xlu0 %v5150, 64
  %v5364 = vpop.permute.xlu0 %5363
  %5365 = vrot.lane.b32.xlu0 %v5151, 64
  %v5366 = vpop.permute.xlu0 %5365
  %5367 = vrot.lane.b32.xlu0 %v5152, 64
  %v5368 = vpop.permute.xlu0 %5367
  %5369 = vrot.lane.b32.xlu0 %v5153, 64
  %v5370 = vpop.permute.xlu0 %5369
  %5371 = vrot.lane.b32.xlu0 %v5154, 64
  %v5372 = vpop.permute.xlu0 %5371
  %5373 = vrot.lane.b32.xlu0 %v5155, 64
  %v5374 = vpop.permute.xlu0 %5373
  %5375 = vrot.lane.b32.xlu0 %v5156, 64
  %v5376 = vpop.permute.xlu0 %5375
  %5377 = vrot.lane.b32.xlu0 %v5157, 64
  %v5378 = vpop.permute.xlu0 %5377
  %5379 = vrot.lane.b32.xlu0 %v5158, 64
  %v5380 = vpop.permute.xlu0 %5379
  %5381 = vrot.lane.b32.xlu0 %v5159, 64
  %v5382 = vpop.permute.xlu0 %5381
  %5383 = vrot.lane.b32.xlu0 %v5160, 64
  %v5384 = vpop.permute.xlu0 %5383
  %5385 = vrot.lane.b32.xlu0 %v5161, 64
  %v5386 = vpop.permute.xlu0 %5385
  %5387 = vrot.lane.b32.xlu0 %v5162, 64
  %v5388 = vpop.permute.xlu0 %5387
  %5389 = vrot.lane.b32.xlu0 %v5163, 64
  %v5390 = vpop.permute.xlu0 %5389
  %5391 = vrot.lane.b32.xlu0 %v5164, 64
  %v5392 = vpop.permute.xlu0 %5391
  %5393 = vrot.lane.b32.xlu0 %v5165, 64
  %v5394 = vpop.permute.xlu0 %5393
  %5395 = vrot.lane.b32.xlu0 %v5166, 64
  %v5396 = vpop.permute.xlu0 %5395
  %5397 = vrot.lane.b32.xlu0 %v5167, 64
  %v5398 = vpop.permute.xlu0 %5397
  %5399 = vrot.lane.b32.xlu0 %v5168, 64
  %v5400 = vpop.permute.xlu0 %5399
  %5401 = vrot.lane.b32.xlu0 %v5169, 64
  %v5402 = vpop.permute.xlu0 %5401
  %5403 = vrot.lane.b32.xlu0 %v5170, 64
  %v5404 = vpop.permute.xlu0 %5403
  %5405 = vrot.lane.b32.xlu0 %v5171, 64
  %v5406 = vpop.permute.xlu0 %5405
  %5407 = vrot.lane.b32.xlu0 %v5172, 64
  %v5408 = vpop.permute.xlu0 %5407
  %5409 = vrot.lane.b32.xlu0 %v5173, 64
  %v5410 = vpop.permute.xlu0 %5409
  %5411 = vrot.lane.b32.xlu0 %v5174, 64
  %v5412 = vpop.permute.xlu0 %5411
  %5413 = vrot.lane.b32.xlu0 %v5175, 64
  %v5414 = vpop.permute.xlu0 %5413
  %5415 = vrot.lane.b32.xlu0 %v5176, 64
  %v5416 = vpop.permute.xlu0 %5415
  %5417 = vrot.lane.b32.xlu0 %v5177, 64
  %v5418 = vpop.permute.xlu0 %5417
  %5419 = vrot.lane.b32.xlu0 %v5178, 64
  %v5420 = vpop.permute.xlu0 %5419
  %5421 = vrot.lane.b32.xlu0 %v5179, 64
  %v5422 = vpop.permute.xlu0 %5421
  %5423 = vrot.lane.b32.xlu0 %v5180, 64
  %v5424 = vpop.permute.xlu0 %5423
  %5425 = vrot.lane.b32.xlu0 %v5181, 64
  %v5426 = vpop.permute.xlu0 %5425
  %5427 = vrot.lane.b32.xlu0 %v5182, 64
  %v5428 = vpop.permute.xlu0 %5427
  %5429 = vrot.lane.b32.xlu0 %v5183, 64
  %v5430 = vpop.permute.xlu0 %5429
  %5431 = vrot.lane.b32.xlu0 %v5184, 64
  %v5432 = vpop.permute.xlu0 %5431
  %5433 = vrot.lane.b32.xlu0 %v5185, 64
  %v5434 = vpop.permute.xlu0 %5433
  %5435 = vrot.lane.b32.xlu0 %v5186, 64
  %v5436 = vpop.permute.xlu0 %5435
  %5437 = vrot.lane.b32.xlu0 %v5187, 64
  %v5438 = vpop.permute.xlu0 %5437
  %5439 = vrot.lane.b32.xlu0 %v5188, 64
  %v5440 = vpop.permute.xlu0 %5439
  %5441 = vrot.lane.b32.xlu0 %v5189, 64
  %v5442 = vpop.permute.xlu0 %5441
  %5443 = vrot.lane.b32.xlu0 %v5190, 64
  %v5444 = vpop.permute.xlu0 %5443
  %5445 = vrot.lane.b32.xlu0 %v5191, 64
  %v5446 = vpop.permute.xlu0 %5445
  %5447 = vrot.lane.b32.xlu0 %v5192, 64
  %v5448 = vpop.permute.xlu0 %5447
  %5449 = vrot.lane.b32.xlu0 %v5193, 64
  %v5450 = vpop.permute.xlu0 %5449
  %5451 = vrot.lane.b32.xlu0 %v5194, 64
  %v5452 = vpop.permute.xlu0 %5451
  %5453 = vrot.lane.b32.xlu0 %v5195, 64
  %v5454 = vpop.permute.xlu0 %5453
  %5455 = vrot.lane.b32.xlu0 %v5196, 64
  %v5456 = vpop.permute.xlu0 %5455
  %5457 = vrot.lane.b32.xlu0 %v5197, 64
  %v5458 = vpop.permute.xlu0 %5457
  %5459 = vrot.lane.b32.xlu0 %v5198, 64
  %v5460 = vpop.permute.xlu0 %5459
  %5461 = vrot.lane.b32.xlu0 %v5199, 64
  %v5462 = vpop.permute.xlu0 %5461
  %5463 = vrot.lane.b32.xlu0 %v5200, 64
  %v5464 = vpop.permute.xlu0 %5463
  %5465 = vrot.lane.b32.xlu0 %v5201, 64
  %v5466 = vpop.permute.xlu0 %5465
  %5467 = vrot.lane.b32.xlu0 %v5202, 64
  %v5468 = vpop.permute.xlu0 %5467
  %5469 = vrot.lane.b32.xlu0 %v5203, 64
  %v5470 = vpop.permute.xlu0 %5469
  %5471 = vrot.lane.b32.xlu0 %v5204, 64
  %v5472 = vpop.permute.xlu0 %5471
  %5473 = vrot.lane.b32.xlu0 %v5205, 64
  %v5474 = vpop.permute.xlu0 %5473
  %5475 = vrot.lane.b32.xlu0 %v5206, 64
  %v5476 = vpop.permute.xlu0 %5475
  %5477 = vrot.lane.b32.xlu0 %v5207, 64
  %v5478 = vpop.permute.xlu0 %5477
  %5479 = vrot.lane.b32.xlu0 %v5208, 64
  %v5480 = vpop.permute.xlu0 %5479
  %5481 = vrot.lane.b32.xlu0 %v5209, 64
  %v5482 = vpop.permute.xlu0 %5481
  %5483 = vrot.lane.b32.xlu0 %v5210, 64
  %v5484 = vpop.permute.xlu0 %5483
  %5485 = vrot.lane.b32.xlu0 %v5211, 64
  %v5486 = vpop.permute.xlu0 %5485
  %5487 = vrot.lane.b32.xlu0 %v5212, 64
  %v5488 = vpop.permute.xlu0 %5487
  %5489 = vrot.lane.b32.xlu0 %v5213, 64
  %v5490 = vpop.permute.xlu0 %5489
  %5491 = vrot.lane.b32.xlu0 %v5214, 64
  %v5492 = vpop.permute.xlu0 %5491
  %5493 = vrot.lane.b32.xlu0 %v5215, 64
  %v5494 = vpop.permute.xlu0 %5493
  %5495 = vrot.lane.b32.xlu0 %v5216, 64
  %v5496 = vpop.permute.xlu0 %5495
  %5497 = vrot.lane.b32.xlu0 %v5217, 64
  %v5498 = vpop.permute.xlu0 %5497
  %5499 = vrot.lane.b32.xlu0 %v5218, 64
  %v5500 = vpop.permute.xlu0 %5499
  %5501 = vrot.lane.b32.xlu0 %v5219, 64
  %v5502 = vpop.permute.xlu0 %5501
  %5503 = vrot.lane.b32.xlu0 %v5220, 64
  %v5504 = vpop.permute.xlu0 %5503
  %5505 = vrot.lane.b32.xlu0 %v5221, 64
  %v5506 = vpop.permute.xlu0 %5505
  %5507 = vrot.lane.b32.xlu0 %v5222, 64
  %v5508 = vpop.permute.xlu0 %5507
  %5509 = vrot.lane.b32.xlu0 %v5223, 64
  %v5510 = vpop.permute.xlu0 %5509
  %5511 = vrot.lane.b32.xlu0 %v5224, 64
  %v5512 = vpop.permute.xlu0 %5511
  %5513 = vrot.lane.b32.xlu0 %v5225, 64
  %v5514 = vpop.permute.xlu0 %5513
  %5515 = vrot.lane.b32.xlu0 %v5226, 64
  %v5516 = vpop.permute.xlu0 %5515
  %5517 = vrot.lane.b32.xlu0 %v5227, 64
  %v5518 = vpop.permute.xlu0 %5517
  %5519 = vrot.lane.b32.xlu0 %v5228, 64
  %v5520 = vpop.permute.xlu0 %5519
  %5521 = vrot.lane.b32.xlu0 %v5229, 64
  %v5522 = vpop.permute.xlu0 %5521
  %5523 = vrot.lane.b32.xlu0 %v5230, 64
  %v5524 = vpop.permute.xlu0 %5523
  %5525 = vrot.lane.b32.xlu0 %v5231, 64
  %v5526 = vpop.permute.xlu0 %5525
  %5527 = vrot.lane.b32.xlu0 %v5232, 64
  %v5528 = vpop.permute.xlu0 %5527
  %5529 = vrot.lane.b32.xlu0 %v5233, 64
  %v5530 = vpop.permute.xlu0 %5529
  %5531 = vrot.lane.b32.xlu0 %v5234, 64
  %v5532 = vpop.permute.xlu0 %5531
  %5533 = vrot.lane.b32.xlu0 %v5235, 64
  %v5534 = vpop.permute.xlu0 %5533
  %5535 = vrot.lane.b32.xlu0 %v5236, 64
  %v5536 = vpop.permute.xlu0 %5535
  %v5637 = vmax.f32 %v5137, %v5338
  %v5638 = vmax.f32 %v5138, %v5340
  %v5639 = vmax.f32 %v5139, %v5342
  %v5640 = vmax.f32 %v5140, %v5344
  %v5641 = vmax.f32 %v5141, %v5346
  %v5642 = vmax.f32 %v5142, %v5348
  %v5643 = vmax.f32 %v5143, %v5350
  %v5644 = vmax.f32 %v5144, %v5352
  %v5645 = vmax.f32 %v5145, %v5354
  %v5646 = vmax.f32 %v5146, %v5356
  %v5647 = vmax.f32 %v5147, %v5358
  %v5648 = vmax.f32 %v5148, %v5360
  %v5649 = vmax.f32 %v5149, %v5362
  %v5650 = vmax.f32 %v5150, %v5364
  %v5651 = vmax.f32 %v5151, %v5366
  %v5652 = vmax.f32 %v5152, %v5368
  %v5653 = vmax.f32 %v5153, %v5370
  %v5654 = vmax.f32 %v5154, %v5372
  %v5655 = vmax.f32 %v5155, %v5374
  %v5656 = vmax.f32 %v5156, %v5376
  %v5657 = vmax.f32 %v5157, %v5378
  %v5658 = vmax.f32 %v5158, %v5380
  %v5659 = vmax.f32 %v5159, %v5382
  %v5660 = vmax.f32 %v5160, %v5384
  %v5661 = vmax.f32 %v5161, %v5386
  %v5662 = vmax.f32 %v5162, %v5388
  %v5663 = vmax.f32 %v5163, %v5390
  %v5664 = vmax.f32 %v5164, %v5392
  %v5665 = vmax.f32 %v5165, %v5394
  %v5666 = vmax.f32 %v5166, %v5396
  %v5667 = vmax.f32 %v5167, %v5398
  %v5668 = vmax.f32 %v5168, %v5400
  %v5669 = vmax.f32 %v5169, %v5402
  %v5670 = vmax.f32 %v5170, %v5404
  %v5671 = vmax.f32 %v5171, %v5406
  %v5672 = vmax.f32 %v5172, %v5408
  %v5673 = vmax.f32 %v5173, %v5410
  %v5674 = vmax.f32 %v5174, %v5412
  %v5675 = vmax.f32 %v5175, %v5414
  %v5676 = vmax.f32 %v5176, %v5416
  %v5677 = vmax.f32 %v5177, %v5418
  %v5678 = vmax.f32 %v5178, %v5420
  %v5679 = vmax.f32 %v5179, %v5422
  %v5680 = vmax.f32 %v5180, %v5424
  %v5681 = vmax.f32 %v5181, %v5426
  %v5682 = vmax.f32 %v5182, %v5428
  %v5683 = vmax.f32 %v5183, %v5430
  %v5684 = vmax.f32 %v5184, %v5432
  %v5685 = vmax.f32 %v5185, %v5434
  %v5686 = vmax.f32 %v5186, %v5436
  %v5687 = vmax.f32 %v5187, %v5438
  %v5688 = vmax.f32 %v5188, %v5440
  %v5689 = vmax.f32 %v5189, %v5442
  %v5690 = vmax.f32 %v5190, %v5444
  %v5691 = vmax.f32 %v5191, %v5446
  %v5692 = vmax.f32 %v5192, %v5448
  %v5693 = vmax.f32 %v5193, %v5450
  %v5694 = vmax.f32 %v5194, %v5452
  %v5695 = vmax.f32 %v5195, %v5454
  %v5696 = vmax.f32 %v5196, %v5456
  %v5697 = vmax.f32 %v5197, %v5458
  %v5698 = vmax.f32 %v5198, %v5460
  %v5699 = vmax.f32 %v5199, %v5462
  %v5700 = vmax.f32 %v5200, %v5464
  %v5701 = vmax.f32 %v5201, %v5466
  %v5702 = vmax.f32 %v5202, %v5468
  %v5703 = vmax.f32 %v5203, %v5470
  %v5704 = vmax.f32 %v5204, %v5472
  %v5705 = vmax.f32 %v5205, %v5474
  %v5706 = vmax.f32 %v5206, %v5476
  %v5707 = vmax.f32 %v5207, %v5478
  %v5708 = vmax.f32 %v5208, %v5480
  %v5709 = vmax.f32 %v5209, %v5482
  %v5710 = vmax.f32 %v5210, %v5484
  %v5711 = vmax.f32 %v5211, %v5486
  %v5712 = vmax.f32 %v5212, %v5488
  %v5713 = vmax.f32 %v5213, %v5490
  %v5714 = vmax.f32 %v5214, %v5492
  %v5715 = vmax.f32 %v5215, %v5494
  %v5716 = vmax.f32 %v5216, %v5496
  %v5717 = vmax.f32 %v5217, %v5498
  %v5718 = vmax.f32 %v5218, %v5500
  %v5719 = vmax.f32 %v5219, %v5502
  %v5720 = vmax.f32 %v5220, %v5504
  %v5721 = vmax.f32 %v5221, %v5506
  %v5722 = vmax.f32 %v5222, %v5508
  %v5723 = vmax.f32 %v5223, %v5510
  %v5724 = vmax.f32 %v5224, %v5512
  %v5725 = vmax.f32 %v5225, %v5514
  %v5726 = vmax.f32 %v5226, %v5516
  %v5727 = vmax.f32 %v5227, %v5518
  %v5728 = vmax.f32 %v5228, %v5520
  %v5729 = vmax.f32 %v5229, %v5522
  %v5730 = vmax.f32 %v5230, %v5524
  %v5731 = vmax.f32 %v5231, %v5526
  %v5732 = vmax.f32 %v5232, %v5528
  %v5733 = vmax.f32 %v5233, %v5530
  %v5734 = vmax.f32 %v5234, %v5532
  %v5735 = vmax.f32 %v5235, %v5534
  %v5736 = vmax.f32 %v5236, %v5536
  %v5737 = vmax.f32 %v3803, %v5637
  %v5738 = vmax.f32 %v3804, %v5638
  %v5739 = vmax.f32 %v3805, %v5639
  %v5740 = vmax.f32 %v3806, %v5640
  %v5741 = vmax.f32 %v3807, %v5641
  %v5742 = vmax.f32 %v3808, %v5642
  %v5743 = vmax.f32 %v3809, %v5643
  %v5744 = vmax.f32 %v3810, %v5644
  %v5745 = vmax.f32 %v3811, %v5645
  %v5746 = vmax.f32 %v3812, %v5646
  %v5747 = vmax.f32 %v3813, %v5647
  %v5748 = vmax.f32 %v3814, %v5648
  %v5749 = vmax.f32 %v3815, %v5649
  %v5750 = vmax.f32 %v3816, %v5650
  %v5751 = vmax.f32 %v3817, %v5651
  %v5752 = vmax.f32 %v3818, %v5652
  %v5753 = vmax.f32 %v3819, %v5653
  %v5754 = vmax.f32 %v3820, %v5654
  %v5755 = vmax.f32 %v3821, %v5655
  %v5756 = vmax.f32 %v3822, %v5656
  %v5757 = vmax.f32 %v3823, %v5657
  %v5758 = vmax.f32 %v3824, %v5658
  %v5759 = vmax.f32 %v3825, %v5659
  %v5760 = vmax.f32 %v3826, %v5660
  %v5761 = vmax.f32 %v3827, %v5661
  %v5762 = vmax.f32 %v3828, %v5662
  %v5763 = vmax.f32 %v3829, %v5663
  %v5764 = vmax.f32 %v3830, %v5664
  %v5765 = vmax.f32 %v3831, %v5665
  %v5766 = vmax.f32 %v3832, %v5666
  %v5767 = vmax.f32 %v3833, %v5667
  %v5768 = vmax.f32 %v3834, %v5668
  %v5769 = vmax.f32 %v3835, %v5669
  %v5770 = vmax.f32 %v3836, %v5670
  %v5771 = vmax.f32 %v3837, %v5671
  %v5772 = vmax.f32 %v3838, %v5672
  %v5773 = vmax.f32 %v3839, %v5673
  %v5774 = vmax.f32 %v3840, %v5674
  %v5775 = vmax.f32 %v3841, %v5675
  %v5776 = vmax.f32 %v3842, %v5676
  %v5777 = vmax.f32 %v3843, %v5677
  %v5778 = vmax.f32 %v3844, %v5678
  %v5779 = vmax.f32 %v3845, %v5679
  %v5780 = vmax.f32 %v3846, %v5680
  %v5781 = vmax.f32 %v3847, %v5681
  %v5782 = vmax.f32 %v3848, %v5682
  %v5783 = vmax.f32 %v3849, %v5683
  %v5784 = vmax.f32 %v3850, %v5684
  %v5785 = vmax.f32 %v3851, %v5685
  %v5786 = vmax.f32 %v3852, %v5686
  %v5787 = vmax.f32 %v3853, %v5687
  %v5788 = vmax.f32 %v3854, %v5688
  %v5789 = vmax.f32 %v3855, %v5689
  %v5790 = vmax.f32 %v3856, %v5690
  %v5791 = vmax.f32 %v3857, %v5691
  %v5792 = vmax.f32 %v3858, %v5692
  %v5793 = vmax.f32 %v3859, %v5693
  %v5794 = vmax.f32 %v3860, %v5694
  %v5795 = vmax.f32 %v3861, %v5695
  %v5796 = vmax.f32 %v3862, %v5696
  %v5797 = vmax.f32 %v3863, %v5697
  %v5798 = vmax.f32 %v3864, %v5698
  %v5799 = vmax.f32 %v3865, %v5699
  %v5800 = vmax.f32 %v3866, %v5700
  %v5801 = vmax.f32 %v3867, %v5701
  %v5802 = vmax.f32 %v3868, %v5702
  %v5803 = vmax.f32 %v3869, %v5703
  %v5804 = vmax.f32 %v3870, %v5704
  %v5805 = vmax.f32 %v3871, %v5705
  %v5806 = vmax.f32 %v3872, %v5706
  %v5807 = vmax.f32 %v3873, %v5707
  %v5808 = vmax.f32 %v3874, %v5708
  %v5809 = vmax.f32 %v3875, %v5709
  %v5810 = vmax.f32 %v3876, %v5710
  %v5811 = vmax.f32 %v3877, %v5711
  %v5812 = vmax.f32 %v3878, %v5712
  %v5813 = vmax.f32 %v3879, %v5713
  %v5814 = vmax.f32 %v3880, %v5714
  %v5815 = vmax.f32 %v3881, %v5715
  %v5816 = vmax.f32 %v3882, %v5716
  %v5817 = vmax.f32 %v3883, %v5717
  %v5818 = vmax.f32 %v3884, %v5718
  %v5819 = vmax.f32 %v3885, %v5719
  %v5820 = vmax.f32 %v3886, %v5720
  %v5821 = vmax.f32 %v3887, %v5721
  %v5822 = vmax.f32 %v3888, %v5722
  %v5823 = vmax.f32 %v3889, %v5723
  %v5824 = vmax.f32 %v3890, %v5724
  %v5825 = vmax.f32 %v3891, %v5725
  %v5826 = vmax.f32 %v3892, %v5726
  %v5827 = vmax.f32 %v3893, %v5727
  %v5828 = vmax.f32 %v3894, %v5728
  %v5829 = vmax.f32 %v3895, %v5729
  %v5830 = vmax.f32 %v3896, %v5730
  %v5831 = vmax.f32 %v3897, %v5731
  %v5832 = vmax.f32 %v3898, %v5732
  %v5833 = vmax.f32 %v3899, %v5733
  %v5834 = vmax.f32 %v3900, %v5734
  %v5835 = vmax.f32 %v3901, %v5735
  %v5836 = vmax.f32 %v3902, %v5736
  %s5837 = scalar_lea.vmem %s0, 2400
  %v5838 = vld [vmem:[%s5837] sm:$0xff]
  %v5839 = vld [vmem:[%s5837 + $0x8] sm:$0xff]
  %v5840 = vld [vmem:[%s5837 + $0x10] sm:$0xff]
  %v5841 = vld [vmem:[%s5837 + $0x18] sm:$0xff]
  %v5842 = vld [vmem:[%s5837 + $0x20] sm:$0xff]
  %v5843 = vld [vmem:[%s5837 + $0x28] sm:$0xff]
  %v5844 = vld [vmem:[%s5837 + $0x30] sm:$0xff]
  %v5845 = vld [vmem:[%s5837 + $0x38] sm:$0xff]
  %v5846 = vld [vmem:[%s5837 + $0x40] sm:$0xff]
  %v5847 = vld [vmem:[%s5837 + $0x48] sm:$0xff]
  %v5848 = vld [vmem:[%s5837 + $0x50] sm:$0xff]
  %v5849 = vld [vmem:[%s5837 + $0x58] sm:$0xff]
  %v5850 = vld [vmem:[%s5837 + $0x60] sm:$0xff]
  %v5851 = vld [vmem:[%s5837 + $0x68] sm:$0xff]
  %v5852 = vld [vmem:[%s5837 + $0x70] sm:$0xff]
  %v5853 = vld [vmem:[%s5837 + $0x78] sm:$0xff]
  %v5854 = vld [vmem:[%s5837 + $0x80] sm:$0xff]
  %v5855 = vld [vmem:[%s5837 + $0x88] sm:$0xff]
  %v5856 = vld [vmem:[%s5837 + $0x90] sm:$0xff]
  %v5857 = vld [vmem:[%s5837 + $0x98] sm:$0xff]
  %v5858 = vld [vmem:[%s5837 + $0xa0] sm:$0xff]
  %v5859 = vld [vmem:[%s5837 + $0xa8] sm:$0xff]
  %v5860 = vld [vmem:[%s5837 + $0xb0] sm:$0xff]
  %v5861 = vld [vmem:[%s5837 + $0xb8] sm:$0xff]
  %v5862 = vld [vmem:[%s5837 + $0xc0] sm:$0xff]
  %v5863 = vld [vmem:[%s5837 + $0xc8] sm:$0xff]
  %v5864 = vld [vmem:[%s5837 + $0xd0] sm:$0xff]
  %v5865 = vld [vmem:[%s5837 + $0xd8] sm:$0xff]
  %v5866 = vld [vmem:[%s5837 + $0xe0] sm:$0xff]
  %v5867 = vld [vmem:[%s5837 + $0xe8] sm:$0xff]
  %v5868 = vld [vmem:[%s5837 + $0xf0] sm:$0xff]
  %v5869 = vld [vmem:[%s5837 + $0xf8] sm:$0xff]
  %v5870 = vld [vmem:[%s5837 + $0x100] sm:$0xff]
  %v5871 = vld [vmem:[%s5837 + $0x108] sm:$0xff]
  %v5872 = vld [vmem:[%s5837 + $0x110] sm:$0xff]
  %v5873 = vld [vmem:[%s5837 + $0x118] sm:$0xff]
  %v5874 = vld [vmem:[%s5837 + $0x120] sm:$0xff]
  %v5875 = vld [vmem:[%s5837 + $0x128] sm:$0xff]
  %v5876 = vld [vmem:[%s5837 + $0x130] sm:$0xff]
  %v5877 = vld [vmem:[%s5837 + $0x138] sm:$0xff]
  %v5878 = vld [vmem:[%s5837 + $0x140] sm:$0xff]
  %v5879 = vld [vmem:[%s5837 + $0x148] sm:$0xff]
  %v5880 = vld [vmem:[%s5837 + $0x150] sm:$0xff]
  %v5881 = vld [vmem:[%s5837 + $0x158] sm:$0xff]
  %v5882 = vld [vmem:[%s5837 + $0x160] sm:$0xff]
  %v5883 = vld [vmem:[%s5837 + $0x168] sm:$0xff]
  %v5884 = vld [vmem:[%s5837 + $0x170] sm:$0xff]
  %v5885 = vld [vmem:[%s5837 + $0x178] sm:$0xff]
  %v5886 = vld [vmem:[%s5837 + $0x180] sm:$0xff]
  %v5887 = vld [vmem:[%s5837 + $0x188] sm:$0xff]
  %v5888 = vld [vmem:[%s5837 + $0x190] sm:$0xff]
  %v5889 = vld [vmem:[%s5837 + $0x198] sm:$0xff]
  %v5890 = vld [vmem:[%s5837 + $0x1a0] sm:$0xff]
  %v5891 = vld [vmem:[%s5837 + $0x1a8] sm:$0xff]
  %v5892 = vld [vmem:[%s5837 + $0x1b0] sm:$0xff]
  %v5893 = vld [vmem:[%s5837 + $0x1b8] sm:$0xff]
  %v5894 = vld [vmem:[%s5837 + $0x1c0] sm:$0xff]
  %v5895 = vld [vmem:[%s5837 + $0x1c8] sm:$0xff]
  %v5896 = vld [vmem:[%s5837 + $0x1d0] sm:$0xff]
  %v5897 = vld [vmem:[%s5837 + $0x1d8] sm:$0xff]
  %v5898 = vld [vmem:[%s5837 + $0x1e0] sm:$0xff]
  %v5899 = vld [vmem:[%s5837 + $0x1e8] sm:$0xff]
  %v5900 = vld [vmem:[%s5837 + $0x1f0] sm:$0xff]
  %v5901 = vld [vmem:[%s5837 + $0x1f8] sm:$0xff]
  %v5902 = vld [vmem:[%s5837 + $0x200] sm:$0xff]
  %v5903 = vld [vmem:[%s5837 + $0x208] sm:$0xff]
  %v5904 = vld [vmem:[%s5837 + $0x210] sm:$0xff]
  %v5905 = vld [vmem:[%s5837 + $0x218] sm:$0xff]
  %v5906 = vld [vmem:[%s5837 + $0x220] sm:$0xff]
  %v5907 = vld [vmem:[%s5837 + $0x228] sm:$0xff]
  %v5908 = vld [vmem:[%s5837 + $0x230] sm:$0xff]
  %v5909 = vld [vmem:[%s5837 + $0x238] sm:$0xff]
  %v5910 = vld [vmem:[%s5837 + $0x240] sm:$0xff]
  %v5911 = vld [vmem:[%s5837 + $0x248] sm:$0xff]
  %v5912 = vld [vmem:[%s5837 + $0x250] sm:$0xff]
  %v5913 = vld [vmem:[%s5837 + $0x258] sm:$0xff]
  %v5914 = vld [vmem:[%s5837 + $0x260] sm:$0xff]
  %v5915 = vld [vmem:[%s5837 + $0x268] sm:$0xff]
  %v5916 = vld [vmem:[%s5837 + $0x270] sm:$0xff]
  %v5917 = vld [vmem:[%s5837 + $0x278] sm:$0xff]
  %v5918 = vld [vmem:[%s5837 + $0x280] sm:$0xff]
  %v5919 = vld [vmem:[%s5837 + $0x288] sm:$0xff]
  %v5920 = vld [vmem:[%s5837 + $0x290] sm:$0xff]
  %v5921 = vld [vmem:[%s5837 + $0x298] sm:$0xff]
  %v5922 = vld [vmem:[%s5837 + $0x2a0] sm:$0xff]
  %v5923 = vld [vmem:[%s5837 + $0x2a8] sm:$0xff]
  %v5924 = vld [vmem:[%s5837 + $0x2b0] sm:$0xff]
  %v5925 = vld [vmem:[%s5837 + $0x2b8] sm:$0xff]
  %v5926 = vld [vmem:[%s5837 + $0x2c0] sm:$0xff]
  %v5927 = vld [vmem:[%s5837 + $0x2c8] sm:$0xff]
  %v5928 = vld [vmem:[%s5837 + $0x2d0] sm:$0xff]
  %v5929 = vld [vmem:[%s5837 + $0x2d8] sm:$0xff]
  %v5930 = vld [vmem:[%s5837 + $0x2e0] sm:$0xff]
  %v5931 = vld [vmem:[%s5837 + $0x2e8] sm:$0xff]
  %v5932 = vld [vmem:[%s5837 + $0x2f0] sm:$0xff]
  %v5933 = vld [vmem:[%s5837 + $0x2f8] sm:$0xff]
  %v5934 = vld [vmem:[%s5837 + $0x300] sm:$0xff]
  %v5935 = vld [vmem:[%s5837 + $0x308] sm:$0xff]
  %v5936 = vld [vmem:[%s5837 + $0x310] sm:$0xff]
  %v5937 = vld [vmem:[%s5837 + $0x318] sm:$0xff]
  %v6038 = vunpack.c.l.b16 %v5838
  %v6039 = vunpack.c.h.b16 %v5838
  %v6040 = vunpack.c.l.b16 %v5839
  %v6041 = vunpack.c.h.b16 %v5839
  %v6042 = vunpack.c.l.b16 %v5840
  %v6043 = vunpack.c.h.b16 %v5840
  %v6044 = vunpack.c.l.b16 %v5841
  %v6045 = vunpack.c.h.b16 %v5841
  %v6046 = vunpack.c.l.b16 %v5842
  %v6047 = vunpack.c.h.b16 %v5842
  %v6048 = vunpack.c.l.b16 %v5843
  %v6049 = vunpack.c.h.b16 %v5843
  %v6050 = vunpack.c.l.b16 %v5844
  %v6051 = vunpack.c.h.b16 %v5844
  %v6052 = vunpack.c.l.b16 %v5845
  %v6053 = vunpack.c.h.b16 %v5845
  %v6054 = vunpack.c.l.b16 %v5846
  %v6055 = vunpack.c.h.b16 %v5846
  %v6056 = vunpack.c.l.b16 %v5847
  %v6057 = vunpack.c.h.b16 %v5847
  %v6058 = vunpack.c.l.b16 %v5848
  %v6059 = vunpack.c.h.b16 %v5848
  %v6060 = vunpack.c.l.b16 %v5849
  %v6061 = vunpack.c.h.b16 %v5849
  %v6062 = vunpack.c.l.b16 %v5850
  %v6063 = vunpack.c.h.b16 %v5850
  %v6064 = vunpack.c.l.b16 %v5851
  %v6065 = vunpack.c.h.b16 %v5851
  %v6066 = vunpack.c.l.b16 %v5852
  %v6067 = vunpack.c.h.b16 %v5852
  %v6068 = vunpack.c.l.b16 %v5853
  %v6069 = vunpack.c.h.b16 %v5853
  %v6070 = vunpack.c.l.b16 %v5854
  %v6071 = vunpack.c.h.b16 %v5854
  %v6072 = vunpack.c.l.b16 %v5855
  %v6073 = vunpack.c.h.b16 %v5855
  %v6074 = vunpack.c.l.b16 %v5856
  %v6075 = vunpack.c.h.b16 %v5856
  %v6076 = vunpack.c.l.b16 %v5857
  %v6077 = vunpack.c.h.b16 %v5857
  %v6078 = vunpack.c.l.b16 %v5858
  %v6079 = vunpack.c.h.b16 %v5858
  %v6080 = vunpack.c.l.b16 %v5859
  %v6081 = vunpack.c.h.b16 %v5859
  %v6082 = vunpack.c.l.b16 %v5860
  %v6083 = vunpack.c.h.b16 %v5860
  %v6084 = vunpack.c.l.b16 %v5861
  %v6085 = vunpack.c.h.b16 %v5861
  %v6086 = vunpack.c.l.b16 %v5862
  %v6087 = vunpack.c.h.b16 %v5862
  %v6088 = vunpack.c.l.b16 %v5863
  %v6089 = vunpack.c.h.b16 %v5863
  %v6090 = vunpack.c.l.b16 %v5864
  %v6091 = vunpack.c.h.b16 %v5864
  %v6092 = vunpack.c.l.b16 %v5865
  %v6093 = vunpack.c.h.b16 %v5865
  %v6094 = vunpack.c.l.b16 %v5866
  %v6095 = vunpack.c.h.b16 %v5866
  %v6096 = vunpack.c.l.b16 %v5867
  %v6097 = vunpack.c.h.b16 %v5867
  %v6098 = vunpack.c.l.b16 %v5868
  %v6099 = vunpack.c.h.b16 %v5868
  %v6100 = vunpack.c.l.b16 %v5869
  %v6101 = vunpack.c.h.b16 %v5869
  %v6102 = vunpack.c.l.b16 %v5870
  %v6103 = vunpack.c.h.b16 %v5870
  %v6104 = vunpack.c.l.b16 %v5871
  %v6105 = vunpack.c.h.b16 %v5871
  %v6106 = vunpack.c.l.b16 %v5872
  %v6107 = vunpack.c.h.b16 %v5872
  %v6108 = vunpack.c.l.b16 %v5873
  %v6109 = vunpack.c.h.b16 %v5873
  %v6110 = vunpack.c.l.b16 %v5874
  %v6111 = vunpack.c.h.b16 %v5874
  %v6112 = vunpack.c.l.b16 %v5875
  %v6113 = vunpack.c.h.b16 %v5875
  %v6114 = vunpack.c.l.b16 %v5876
  %v6115 = vunpack.c.h.b16 %v5876
  %v6116 = vunpack.c.l.b16 %v5877
  %v6117 = vunpack.c.h.b16 %v5877
  %v6118 = vunpack.c.l.b16 %v5878
  %v6119 = vunpack.c.h.b16 %v5878
  %v6120 = vunpack.c.l.b16 %v5879
  %v6121 = vunpack.c.h.b16 %v5879
  %v6122 = vunpack.c.l.b16 %v5880
  %v6123 = vunpack.c.h.b16 %v5880
  %v6124 = vunpack.c.l.b16 %v5881
  %v6125 = vunpack.c.h.b16 %v5881
  %v6126 = vunpack.c.l.b16 %v5882
  %v6127 = vunpack.c.h.b16 %v5882
  %v6128 = vunpack.c.l.b16 %v5883
  %v6129 = vunpack.c.h.b16 %v5883
  %v6130 = vunpack.c.l.b16 %v5884
  %v6131 = vunpack.c.h.b16 %v5884
  %v6132 = vunpack.c.l.b16 %v5885
  %v6133 = vunpack.c.h.b16 %v5885
  %v6134 = vunpack.c.l.b16 %v5886
  %v6135 = vunpack.c.h.b16 %v5886
  %v6136 = vunpack.c.l.b16 %v5887
  %v6137 = vunpack.c.h.b16 %v5887
  %v6138 = vunpack.c.l.b16 %v5888
  %v6139 = vunpack.c.h.b16 %v5888
  %v6140 = vunpack.c.l.b16 %v5889
  %v6141 = vunpack.c.h.b16 %v5889
  %v6142 = vunpack.c.l.b16 %v5890
  %v6143 = vunpack.c.h.b16 %v5890
  %v6144 = vunpack.c.l.b16 %v5891
  %v6145 = vunpack.c.h.b16 %v5891
  %v6146 = vunpack.c.l.b16 %v5892
  %v6147 = vunpack.c.h.b16 %v5892
  %v6148 = vunpack.c.l.b16 %v5893
  %v6149 = vunpack.c.h.b16 %v5893
  %v6150 = vunpack.c.l.b16 %v5894
  %v6151 = vunpack.c.h.b16 %v5894
  %v6152 = vunpack.c.l.b16 %v5895
  %v6153 = vunpack.c.h.b16 %v5895
  %v6154 = vunpack.c.l.b16 %v5896
  %v6155 = vunpack.c.h.b16 %v5896
  %v6156 = vunpack.c.l.b16 %v5897
  %v6157 = vunpack.c.h.b16 %v5897
  %v6158 = vunpack.c.l.b16 %v5898
  %v6159 = vunpack.c.h.b16 %v5898
  %v6160 = vunpack.c.l.b16 %v5899
  %v6161 = vunpack.c.h.b16 %v5899
  %v6162 = vunpack.c.l.b16 %v5900
  %v6163 = vunpack.c.h.b16 %v5900
  %v6164 = vunpack.c.l.b16 %v5901
  %v6165 = vunpack.c.h.b16 %v5901
  %v6166 = vunpack.c.l.b16 %v5902
  %v6167 = vunpack.c.h.b16 %v5902
  %v6168 = vunpack.c.l.b16 %v5903
  %v6169 = vunpack.c.h.b16 %v5903
  %v6170 = vunpack.c.l.b16 %v5904
  %v6171 = vunpack.c.h.b16 %v5904
  %v6172 = vunpack.c.l.b16 %v5905
  %v6173 = vunpack.c.h.b16 %v5905
  %v6174 = vunpack.c.l.b16 %v5906
  %v6175 = vunpack.c.h.b16 %v5906
  %v6176 = vunpack.c.l.b16 %v5907
  %v6177 = vunpack.c.h.b16 %v5907
  %v6178 = vunpack.c.l.b16 %v5908
  %v6179 = vunpack.c.h.b16 %v5908
  %v6180 = vunpack.c.l.b16 %v5909
  %v6181 = vunpack.c.h.b16 %v5909
  %v6182 = vunpack.c.l.b16 %v5910
  %v6183 = vunpack.c.h.b16 %v5910
  %v6184 = vunpack.c.l.b16 %v5911
  %v6185 = vunpack.c.h.b16 %v5911
  %v6186 = vunpack.c.l.b16 %v5912
  %v6187 = vunpack.c.h.b16 %v5912
  %v6188 = vunpack.c.l.b16 %v5913
  %v6189 = vunpack.c.h.b16 %v5913
  %v6190 = vunpack.c.l.b16 %v5914
  %v6191 = vunpack.c.h.b16 %v5914
  %v6192 = vunpack.c.l.b16 %v5915
  %v6193 = vunpack.c.h.b16 %v5915
  %v6194 = vunpack.c.l.b16 %v5916
  %v6195 = vunpack.c.h.b16 %v5916
  %v6196 = vunpack.c.l.b16 %v5917
  %v6197 = vunpack.c.h.b16 %v5917
  %v6198 = vunpack.c.l.b16 %v5918
  %v6199 = vunpack.c.h.b16 %v5918
  %v6200 = vunpack.c.l.b16 %v5919
  %v6201 = vunpack.c.h.b16 %v5919
  %v6202 = vunpack.c.l.b16 %v5920
  %v6203 = vunpack.c.h.b16 %v5920
  %v6204 = vunpack.c.l.b16 %v5921
  %v6205 = vunpack.c.h.b16 %v5921
  %v6206 = vunpack.c.l.b16 %v5922
  %v6207 = vunpack.c.h.b16 %v5922
  %v6208 = vunpack.c.l.b16 %v5923
  %v6209 = vunpack.c.h.b16 %v5923
  %v6210 = vunpack.c.l.b16 %v5924
  %v6211 = vunpack.c.h.b16 %v5924
  %v6212 = vunpack.c.l.b16 %v5925
  %v6213 = vunpack.c.h.b16 %v5925
  %v6214 = vunpack.c.l.b16 %v5926
  %v6215 = vunpack.c.h.b16 %v5926
  %v6216 = vunpack.c.l.b16 %v5927
  %v6217 = vunpack.c.h.b16 %v5927
  %v6218 = vunpack.c.l.b16 %v5928
  %v6219 = vunpack.c.h.b16 %v5928
  %v6220 = vunpack.c.l.b16 %v5929
  %v6221 = vunpack.c.h.b16 %v5929
  %v6222 = vunpack.c.l.b16 %v5930
  %v6223 = vunpack.c.h.b16 %v5930
  %v6224 = vunpack.c.l.b16 %v5931
  %v6225 = vunpack.c.h.b16 %v5931
  %v6226 = vunpack.c.l.b16 %v5932
  %v6227 = vunpack.c.h.b16 %v5932
  %v6228 = vunpack.c.l.b16 %v5933
  %v6229 = vunpack.c.h.b16 %v5933
  %v6230 = vunpack.c.l.b16 %v5934
  %v6231 = vunpack.c.h.b16 %v5934
  %v6232 = vunpack.c.l.b16 %v5935
  %v6233 = vunpack.c.h.b16 %v5935
  %v6234 = vunpack.c.l.b16 %v5936
  %v6235 = vunpack.c.h.b16 %v5936
  %v6236 = vunpack.c.l.b16 %v5937
  %v6237 = vunpack.c.h.b16 %v5937
  %v6238 = vpack.c.b16 %v6040, %v6038
  %v6239 = vpack.c.b16 %v6041, %v6039
  %v6240 = vpack.c.b16 %v6044, %v6042
  %v6241 = vpack.c.b16 %v6045, %v6043
  %v6242 = vpack.c.b16 %v6048, %v6046
  %v6243 = vpack.c.b16 %v6049, %v6047
  %v6244 = vpack.c.b16 %v6052, %v6050
  %v6245 = vpack.c.b16 %v6053, %v6051
  %v6246 = vpack.c.b16 %v6056, %v6054
  %v6247 = vpack.c.b16 %v6057, %v6055
  %v6248 = vpack.c.b16 %v6060, %v6058
  %v6249 = vpack.c.b16 %v6061, %v6059
  %v6250 = vpack.c.b16 %v6064, %v6062
  %v6251 = vpack.c.b16 %v6065, %v6063
  %v6252 = vpack.c.b16 %v6068, %v6066
  %v6253 = vpack.c.b16 %v6069, %v6067
  %v6254 = vpack.c.b16 %v6072, %v6070
  %v6255 = vpack.c.b16 %v6073, %v6071
  %v6256 = vpack.c.b16 %v6076, %v6074
  %v6257 = vpack.c.b16 %v6077, %v6075
  %v6258 = vpack.c.b16 %v6080, %v6078
  %v6259 = vpack.c.b16 %v6081, %v6079
  %v6260 = vpack.c.b16 %v6084, %v6082
  %v6261 = vpack.c.b16 %v6085, %v6083
  %v6262 = vpack.c.b16 %v6088, %v6086
  %v6263 = vpack.c.b16 %v6089, %v6087
  %v6264 = vpack.c.b16 %v6092, %v6090
  %v6265 = vpack.c.b16 %v6093, %v6091
  %v6266 = vpack.c.b16 %v6096, %v6094
  %v6267 = vpack.c.b16 %v6097, %v6095
  %v6268 = vpack.c.b16 %v6100, %v6098
  %v6269 = vpack.c.b16 %v6101, %v6099
  %v6270 = vpack.c.b16 %v6104, %v6102
  %v6271 = vpack.c.b16 %v6105, %v6103
  %v6272 = vpack.c.b16 %v6108, %v6106
  %v6273 = vpack.c.b16 %v6109, %v6107
  %v6274 = vpack.c.b16 %v6112, %v6110
  %v6275 = vpack.c.b16 %v6113, %v6111
  %v6276 = vpack.c.b16 %v6116, %v6114
  %v6277 = vpack.c.b16 %v6117, %v6115
  %v6278 = vpack.c.b16 %v6120, %v6118
  %v6279 = vpack.c.b16 %v6121, %v6119
  %v6280 = vpack.c.b16 %v6124, %v6122
  %v6281 = vpack.c.b16 %v6125, %v6123
  %v6282 = vpack.c.b16 %v6128, %v6126
  %v6283 = vpack.c.b16 %v6129, %v6127
  %v6284 = vpack.c.b16 %v6132, %v6130
  %v6285 = vpack.c.b16 %v6133, %v6131
  %v6286 = vpack.c.b16 %v6136, %v6134
  %v6287 = vpack.c.b16 %v6137, %v6135
  %v6288 = vpack.c.b16 %v6140, %v6138
  %v6289 = vpack.c.b16 %v6141, %v6139
  %v6290 = vpack.c.b16 %v6144, %v6142
  %v6291 = vpack.c.b16 %v6145, %v6143
  %v6292 = vpack.c.b16 %v6148, %v6146
  %v6293 = vpack.c.b16 %v6149, %v6147
  %v6294 = vpack.c.b16 %v6152, %v6150
  %v6295 = vpack.c.b16 %v6153, %v6151
  %v6296 = vpack.c.b16 %v6156, %v6154
  %v6297 = vpack.c.b16 %v6157, %v6155
  %v6298 = vpack.c.b16 %v6160, %v6158
  %v6299 = vpack.c.b16 %v6161, %v6159
  %v6300 = vpack.c.b16 %v6164, %v6162
  %v6301 = vpack.c.b16 %v6165, %v6163
  %v6302 = vpack.c.b16 %v6168, %v6166
  %v6303 = vpack.c.b16 %v6169, %v6167
  %v6304 = vpack.c.b16 %v6172, %v6170
  %v6305 = vpack.c.b16 %v6173, %v6171
  %v6306 = vpack.c.b16 %v6176, %v6174
  %v6307 = vpack.c.b16 %v6177, %v6175
  %v6308 = vpack.c.b16 %v6180, %v6178
  %v6309 = vpack.c.b16 %v6181, %v6179
  %v6310 = vpack.c.b16 %v6184, %v6182
  %v6311 = vpack.c.b16 %v6185, %v6183
  %v6312 = vpack.c.b16 %v6188, %v6186
  %v6313 = vpack.c.b16 %v6189, %v6187
  %v6314 = vpack.c.b16 %v6192, %v6190
  %v6315 = vpack.c.b16 %v6193, %v6191
  %v6316 = vpack.c.b16 %v6196, %v6194
  %v6317 = vpack.c.b16 %v6197, %v6195
  %v6318 = vpack.c.b16 %v6200, %v6198
  %v6319 = vpack.c.b16 %v6201, %v6199
  %v6320 = vpack.c.b16 %v6204, %v6202
  %v6321 = vpack.c.b16 %v6205, %v6203
  %v6322 = vpack.c.b16 %v6208, %v6206
  %v6323 = vpack.c.b16 %v6209, %v6207
  %v6324 = vpack.c.b16 %v6212, %v6210
  %v6325 = vpack.c.b16 %v6213, %v6211
  %v6326 = vpack.c.b16 %v6216, %v6214
  %v6327 = vpack.c.b16 %v6217, %v6215
  %v6328 = vpack.c.b16 %v6220, %v6218
  %v6329 = vpack.c.b16 %v6221, %v6219
  %v6330 = vpack.c.b16 %v6224, %v6222
  %v6331 = vpack.c.b16 %v6225, %v6223
  %v6332 = vpack.c.b16 %v6228, %v6226
  %v6333 = vpack.c.b16 %v6229, %v6227
  %v6334 = vpack.c.b16 %v6232, %v6230
  %v6335 = vpack.c.b16 %v6233, %v6231
  %v6336 = vpack.c.b16 %v6236, %v6234
  %v6337 = vpack.c.b16 %v6237, %v6235
  %v6389 = vsel %vm685, %v6239, 0
  %v6392 = vsel %vm685, %v6241, 0
  %v6395 = vsel %vm685, %v6243, 0
  %v6398 = vsel %vm685, %v6245, 0
  %v6401 = vsel %vm685, %v6247, 0
  %v6404 = vsel %vm685, %v6249, 0
  %v6407 = vsel %vm685, %v6251, 0
  %v6410 = vsel %vm685, %v6253, 0
  %v6413 = vsel %vm685, %v6255, 0
  %v6416 = vsel %vm685, %v6257, 0
  %v6419 = vsel %vm685, %v6259, 0
  %v6422 = vsel %vm685, %v6261, 0
  %v6425 = vsel %vm685, %v6263, 0
  %v6428 = vsel %vm685, %v6265, 0
  %v6431 = vsel %vm685, %v6267, 0
  %v6434 = vsel %vm685, %v6269, 0
  %v6437 = vsel %vm685, %v6271, 0
  %v6440 = vsel %vm685, %v6273, 0
  %v6443 = vsel %vm685, %v6275, 0
  %v6446 = vsel %vm685, %v6277, 0
  %v6449 = vsel %vm685, %v6279, 0
  %v6452 = vsel %vm685, %v6281, 0
  %v6455 = vsel %vm685, %v6283, 0
  %v6458 = vsel %vm685, %v6285, 0
  %v6461 = vsel %vm685, %v6287, 0
  %v6464 = vsel %vm685, %v6289, 0
  %v6467 = vsel %vm685, %v6291, 0
  %v6470 = vsel %vm685, %v6293, 0
  %v6473 = vsel %vm685, %v6295, 0
  %v6476 = vsel %vm685, %v6297, 0
  %v6479 = vsel %vm685, %v6299, 0
  %v6482 = vsel %vm685, %v6301, 0
  %v6485 = vsel %vm685, %v6303, 0
  %v6488 = vsel %vm685, %v6305, 0
  %v6491 = vsel %vm685, %v6307, 0
  %v6494 = vsel %vm685, %v6309, 0
  %v6497 = vsel %vm685, %v6311, 0
  %v6500 = vsel %vm685, %v6313, 0
  %v6503 = vsel %vm685, %v6315, 0
  %v6506 = vsel %vm685, %v6317, 0
  %v6509 = vsel %vm685, %v6319, 0
  %v6512 = vsel %vm685, %v6321, 0
  %v6515 = vsel %vm685, %v6323, 0
  %v6518 = vsel %vm685, %v6325, 0
  %v6521 = vsel %vm685, %v6327, 0
  %v6524 = vsel %vm685, %v6329, 0
  %v6527 = vsel %vm685, %v6331, 0
  %v6530 = vsel %vm685, %v6333, 0
  %v6533 = vsel %vm685, %v6335, 0
  %v6536 = vsel %vm685, %v6337, 0
  %6538 = vmatprep.subr.bf16.mxu0 %v650
  %6539 = vmatpush1.bf16.msra.mxu0 %v649
  %6540 = vmatprep.subr.bf16.mxu0 %v652
  %6541 = vmatpush1.bf16.msra.mxu0 %v651
  %6542 = vmatprep.subr.bf16.mxu0 %v654
  %6543 = vmatpush1.bf16.msra.mxu0 %v653
  %6544 = vmatprep.subr.bf16.mxu0 %v656
  %6545 = vmatpush1.bf16.msra.mxu0 %v655
  %6546 = vmatprep.subr.bf16.mxu0 %v658
  %6547 = vmatpush1.bf16.msra.mxu0 %v657
  %6548 = vmatprep.subr.bf16.mxu0 %v660
  %6549 = vmatpush1.bf16.msra.mxu0 %v659
  %6550 = vmatprep.subr.bf16.mxu0 %v662
  %6551 = vmatpush1.bf16.msra.mxu0 %v661
  %6552 = vmatprep.subr.bf16.mxu0 %v664
  %6553 = vmatpush1.bf16.msra.mxu0 %v663
  %6554 = vmatprep.subr.bf16.mxu0 %v666
  %6555 = vmatpush1.bf16.msra.mxu0 %v665
  %6556 = vmatprep.subr.bf16.mxu0 0
  %6557 = vmatpush1.bf16.msra.mxu0 0
  %6558 = vmatprep.subr.bf16.mxu0 0
  %6559 = vmatpush1.bf16.msra.mxu0 0
  %6560 = vmatprep.subr.bf16.mxu0 0
  %6561 = vmatpush1.bf16.msra.mxu0 0
  %6562 = vmatprep.subr.bf16.mxu0 0
  %6563 = vmatpush1.bf16.msra.mxu0 0
  %6564 = vmatprep.subr.bf16.mxu0 0
  %6565 = vmatpush1.bf16.msra.mxu0 0
  %6566 = vmatprep.subr.bf16.mxu0 0
  %6567 = vmatpush1.bf16.msra.mxu0 0
  %6568 = vmatprep.subr.bf16.mxu0 0
  %6569 = vmatpush1.bf16.msra.mxu0 0
  %6570 = vmatprep.mubr.bf16.mxu0 %v6389
  %6571 = vmatmul.mubr.bf16.gmra.mrb[0].mxu0 %v6238
  %v6572 = vpop.f32.mrb[0].mxu0
  %v6573 = vadd.f32 0.0, %v6572
  %v6574 = vpop.f32.mrb[0].mxu0
  %v6575 = vadd.f32 0.0, %v6574
  %v6576 = vpop.f32.mrb[0].mxu0
  %v6577 = vadd.f32 0.0, %v6576
  %v6578 = vpop.f32.mrb[0].mxu0
  %v6579 = vadd.f32 0.0, %v6578
  %6580 = vmatprep.mubr.bf16.mxu0 %v6392
  %6581 = vmatmul.mubr.bf16.gmra.mrb[0].mxu0 %v6240
  %v6582 = vpop.f32.mrb[0].mxu0
  %v6583 = vadd.f32 0.0, %v6582
  %v6584 = vpop.f32.mrb[0].mxu0
  %v6585 = vadd.f32 0.0, %v6584
  %v6586 = vpop.f32.mrb[0].mxu0
  %v6587 = vadd.f32 0.0, %v6586
  %v6588 = vpop.f32.mrb[0].mxu0
  %v6589 = vadd.f32 0.0, %v6588
  %6590 = vmatprep.mubr.bf16.mxu0 %v6395
  %6591 = vmatmul.mubr.bf16.gmra.mrb[0].mxu0 %v6242
  %v6592 = vpop.f32.mrb[0].mxu0
  %v6593 = vadd.f32 0.0, %v6592
  %v6594 = vpop.f32.mrb[0].mxu0
  %v6595 = vadd.f32 0.0, %v6594
  %v6596 = vpop.f32.mrb[0].mxu0
  %v6597 = vadd.f32 0.0, %v6596
  %v6598 = vpop.f32.mrb[0].mxu0
  %v6599 = vadd.f32 0.0, %v6598
  %6600 = vmatprep.mubr.bf16.mxu0 %v6398
  %6601 = vmatmul.mubr.bf16.gmra.mrb[0].mxu0 %v6244
  %v6602 = vpop.f32.mrb[0].mxu0
  %v6603 = vadd.f32 0.0, %v6602
  %v6604 = vpop.f32.mrb[0].mxu0
  %v6605 = vadd.f32 0.0, %v6604
  %v6606 = vpop.f32.mrb[0].mxu0
  %v6607 = vadd.f32 0.0, %v6606
  %v6608 = vpop.f32.mrb[0].mxu0
  %v6609 = vadd.f32 0.0, %v6608
  %6610 = vmatprep.mubr.bf16.mxu0 %v6401
  %6611 = vmatmul.mubr.bf16.gmra.mrb[0].mxu0 %v6246
  %v6612 = vpop.f32.mrb[0].mxu0
  %v6613 = vadd.f32 0.0, %v6612
  %v6614 = vpop.f32.mrb[0].mxu0
  %v6615 = vadd.f32 0.0, %v6614
  %v6616 = vpop.f32.mrb[0].mxu0
  %v6617 = vadd.f32 0.0, %v6616
  %v6618 = vpop.f32.mrb[0].mxu0
  %v6619 = vadd.f32 0.0, %v6618
  %6620 = vmatprep.mubr.bf16.mxu0 %v6404
  %6621 = vmatmul.mubr.bf16.gmra.mrb[0].mxu0 %v6248
  %v6622 = vpop.f32.mrb[0].mxu0
  %v6623 = vadd.f32 0.0, %v6622
  %v6624 = vpop.f32.mrb[0].mxu0
  %v6625 = vadd.f32 0.0, %v6624
  %v6626 = vpop.f32.mrb[0].mxu0
  %v6627 = vadd.f32 0.0, %v6626
  %v6628 = vpop.f32.mrb[0].mxu0
  %v6629 = vadd.f32 0.0, %v6628
  %6630 = vmatprep.mubr.bf16.mxu0 %v6407
  %6631 = vmatmul.mubr.bf16.gmra.mrb[0].mxu0 %v6250
  %v6632 = vpop.f32.mrb[0].mxu0
  %v6633 = vadd.f32 0.0, %v6632
  %v6634 = vpop.f32.mrb[0].mxu0
  %v6635 = vadd.f32 0.0, %v6634
  %v6636 = vpop.f32.mrb[0].mxu0
  %v6637 = vadd.f32 0.0, %v6636
  %v6638 = vpop.f32.mrb[0].mxu0
  %v6639 = vadd.f32 0.0, %v6638
  %6640 = vmatprep.mubr.bf16.mxu0 %v6410
  %6641 = vmatmul.mubr.bf16.gmra.mrb[0].mxu0 %v6252
  %v6642 = vpop.f32.mrb[0].mxu0
  %v6643 = vadd.f32 0.0, %v6642
  %v6644 = vpop.f32.mrb[0].mxu0
  %v6645 = vadd.f32 0.0, %v6644
  %v6646 = vpop.f32.mrb[0].mxu0
  %v6647 = vadd.f32 0.0, %v6646
  %v6648 = vpop.f32.mrb[0].mxu0
  %v6649 = vadd.f32 0.0, %v6648
  %6650 = vmatprep.mubr.bf16.mxu0 %v6413
  %6651 = vmatmul.mubr.bf16.gmra.mrb[0].mxu0 %v6254
  %v6652 = vpop.f32.mrb[0].mxu0
  %v6653 = vadd.f32 0.0, %v6652
  %v6654 = vpop.f32.mrb[0].mxu0
  %v6655 = vadd.f32 0.0, %v6654
  %v6656 = vpop.f32.mrb[0].mxu0
  %v6657 = vadd.f32 0.0, %v6656
  %v6658 = vpop.f32.mrb[0].mxu0
  %v6659 = vadd.f32 0.0, %v6658
  %6660 = vmatprep.mubr.bf16.mxu0 %v6416
  %6661 = vmatmul.mubr.bf16.gmra.mrb[0].mxu0 %v6256
  %v6662 = vpop.f32.mrb[0].mxu0
  %v6663 = vadd.f32 0.0, %v6662
  %v6664 = vpop.f32.mrb[0].mxu0
  %v6665 = vadd.f32 0.0, %v6664
  %v6666 = vpop.f32.mrb[0].mxu0
  %v6667 = vadd.f32 0.0, %v6666
  %v6668 = vpop.f32.mrb[0].mxu0
  %v6669 = vadd.f32 0.0, %v6668
  %6670 = vmatprep.mubr.bf16.mxu0 %v6419
  %6671 = vmatmul.mubr.bf16.gmra.mrb[0].mxu0 %v6258
  %v6672 = vpop.f32.mrb[0].mxu0
  %v6673 = vadd.f32 0.0, %v6672
  %v6674 = vpop.f32.mrb[0].mxu0
  %v6675 = vadd.f32 0.0, %v6674
  %v6676 = vpop.f32.mrb[0].mxu0
  %v6677 = vadd.f32 0.0, %v6676
  %v6678 = vpop.f32.mrb[0].mxu0
  %v6679 = vadd.f32 0.0, %v6678
  %6680 = vmatprep.mubr.bf16.mxu0 %v6422
  %6681 = vmatmul.mubr.bf16.gmra.mrb[0].mxu0 %v6260
  %v6682 = vpop.f32.mrb[0].mxu0
  %v6683 = vadd.f32 0.0, %v6682
  %v6684 = vpop.f32.mrb[0].mxu0
  %v6685 = vadd.f32 0.0, %v6684
  %v6686 = vpop.f32.mrb[0].mxu0
  %v6687 = vadd.f32 0.0, %v6686
  %v6688 = vpop.f32.mrb[0].mxu0
  %v6689 = vadd.f32 0.0, %v6688
  %6690 = vmatprep.mubr.bf16.mxu0 %v6425
  %6691 = vmatmul.mubr.bf16.gmra.mrb[0].mxu0 %v6262
  %v6692 = vpop.f32.mrb[0].mxu0
  %v6693 = vadd.f32 0.0, %v6692
  %v6694 = vpop.f32.mrb[0].mxu0
  %v6695 = vadd.f32 0.0, %v6694
  %v6696 = vpop.f32.mrb[0].mxu0
  %v6697 = vadd.f32 0.0, %v6696
  %v6698 = vpop.f32.mrb[0].mxu0
  %v6699 = vadd.f32 0.0, %v6698
  %6700 = vmatprep.mubr.bf16.mxu0 %v6428
  %6701 = vmatmul.mubr.bf16.gmra.mrb[0].mxu0 %v6264
  %v6702 = vpop.f32.mrb[0].mxu0
  %v6703 = vadd.f32 0.0, %v6702
  %v6704 = vpop.f32.mrb[0].mxu0
  %v6705 = vadd.f32 0.0, %v6704
  %v6706 = vpop.f32.mrb[0].mxu0
  %v6707 = vadd.f32 0.0, %v6706
  %v6708 = vpop.f32.mrb[0].mxu0
  %v6709 = vadd.f32 0.0, %v6708
  %6710 = vmatprep.mubr.bf16.mxu0 %v6431
  %6711 = vmatmul.mubr.bf16.gmra.mrb[0].mxu0 %v6266
  %v6712 = vpop.f32.mrb[0].mxu0
  %v6713 = vadd.f32 0.0, %v6712
  %v6714 = vpop.f32.mrb[0].mxu0
  %v6715 = vadd.f32 0.0, %v6714
  %v6716 = vpop.f32.mrb[0].mxu0
  %v6717 = vadd.f32 0.0, %v6716
  %v6718 = vpop.f32.mrb[0].mxu0
  %v6719 = vadd.f32 0.0, %v6718
  %6720 = vmatprep.mubr.bf16.mxu0 %v6434
  %6721 = vmatmul.mubr.bf16.gmra.mrb[0].mxu0 %v6268
  %v6722 = vpop.f32.mrb[0].mxu0
  %v6723 = vadd.f32 0.0, %v6722
  %v6724 = vpop.f32.mrb[0].mxu0
  %v6725 = vadd.f32 0.0, %v6724
  %v6726 = vpop.f32.mrb[0].mxu0
  %v6727 = vadd.f32 0.0, %v6726
  %v6728 = vpop.f32.mrb[0].mxu0
  %v6729 = vadd.f32 0.0, %v6728
  %6730 = vmatprep.mubr.bf16.mxu0 %v6437
  %6731 = vmatmul.mubr.bf16.gmra.mrb[0].mxu0 %v6270
  %v6732 = vpop.f32.mrb[0].mxu0
  %v6733 = vadd.f32 0.0, %v6732
  %v6734 = vpop.f32.mrb[0].mxu0
  %v6735 = vadd.f32 0.0, %v6734
  %v6736 = vpop.f32.mrb[0].mxu0
  %v6737 = vadd.f32 0.0, %v6736
  %v6738 = vpop.f32.mrb[0].mxu0
  %v6739 = vadd.f32 0.0, %v6738
  %6740 = vmatprep.mubr.bf16.mxu0 %v6440
  %6741 = vmatmul.mubr.bf16.gmra.mrb[0].mxu0 %v6272
  %v6742 = vpop.f32.mrb[0].mxu0
  %v6743 = vadd.f32 0.0, %v6742
  %v6744 = vpop.f32.mrb[0].mxu0
  %v6745 = vadd.f32 0.0, %v6744
  %v6746 = vpop.f32.mrb[0].mxu0
  %v6747 = vadd.f32 0.0, %v6746
  %v6748 = vpop.f32.mrb[0].mxu0
  %v6749 = vadd.f32 0.0, %v6748
  %6750 = vmatprep.mubr.bf16.mxu0 %v6443
  %6751 = vmatmul.mubr.bf16.gmra.mrb[0].mxu0 %v6274
  %v6752 = vpop.f32.mrb[0].mxu0
  %v6753 = vadd.f32 0.0, %v6752
  %v6754 = vpop.f32.mrb[0].mxu0
  %v6755 = vadd.f32 0.0, %v6754
  %v6756 = vpop.f32.mrb[0].mxu0
  %v6757 = vadd.f32 0.0, %v6756
  %v6758 = vpop.f32.mrb[0].mxu0
  %v6759 = vadd.f32 0.0, %v6758
  %6760 = vmatprep.mubr.bf16.mxu0 %v6446
  %6761 = vmatmul.mubr.bf16.gmra.mrb[0].mxu0 %v6276
  %v6762 = vpop.f32.mrb[0].mxu0
  %v6763 = vadd.f32 0.0, %v6762
  %v6764 = vpop.f32.mrb[0].mxu0
  %v6765 = vadd.f32 0.0, %v6764
  %v6766 = vpop.f32.mrb[0].mxu0
  %v6767 = vadd.f32 0.0, %v6766
  %v6768 = vpop.f32.mrb[0].mxu0
  %v6769 = vadd.f32 0.0, %v6768
  %6770 = vmatprep.mubr.bf16.mxu0 %v6449
  %6771 = vmatmul.mubr.bf16.gmra.mrb[0].mxu0 %v6278
  %v6772 = vpop.f32.mrb[0].mxu0
  %v6773 = vadd.f32 0.0, %v6772
  %v6774 = vpop.f32.mrb[0].mxu0
  %v6775 = vadd.f32 0.0, %v6774
  %v6776 = vpop.f32.mrb[0].mxu0
  %v6777 = vadd.f32 0.0, %v6776
  %v6778 = vpop.f32.mrb[0].mxu0
  %v6779 = vadd.f32 0.0, %v6778
  %6780 = vmatprep.mubr.bf16.mxu0 %v6452
  %6781 = vmatmul.mubr.bf16.gmra.mrb[0].mxu0 %v6280
  %v6782 = vpop.f32.mrb[0].mxu0
  %v6783 = vadd.f32 0.0, %v6782
  %v6784 = vpop.f32.mrb[0].mxu0
  %v6785 = vadd.f32 0.0, %v6784
  %v6786 = vpop.f32.mrb[0].mxu0
  %v6787 = vadd.f32 0.0, %v6786
  %v6788 = vpop.f32.mrb[0].mxu0
  %v6789 = vadd.f32 0.0, %v6788
  %6790 = vmatprep.mubr.bf16.mxu0 %v6455
  %6791 = vmatmul.mubr.bf16.gmra.mrb[0].mxu0 %v6282
  %v6792 = vpop.f32.mrb[0].mxu0
  %v6793 = vadd.f32 0.0, %v6792
  %v6794 = vpop.f32.mrb[0].mxu0
  %v6795 = vadd.f32 0.0, %v6794
  %v6796 = vpop.f32.mrb[0].mxu0
  %v6797 = vadd.f32 0.0, %v6796
  %v6798 = vpop.f32.mrb[0].mxu0
  %v6799 = vadd.f32 0.0, %v6798
  %6800 = vmatprep.mubr.bf16.mxu0 %v6458
  %6801 = vmatmul.mubr.bf16.gmra.mrb[0].mxu0 %v6284
  %v6802 = vpop.f32.mrb[0].mxu0
  %v6803 = vadd.f32 0.0, %v6802
  %v6804 = vpop.f32.mrb[0].mxu0
  %v6805 = vadd.f32 0.0, %v6804
  %v6806 = vpop.f32.mrb[0].mxu0
  %v6807 = vadd.f32 0.0, %v6806
  %v6808 = vpop.f32.mrb[0].mxu0
  %v6809 = vadd.f32 0.0, %v6808
  %6810 = vmatprep.mubr.bf16.mxu0 %v6461
  %6811 = vmatmul.mubr.bf16.gmra.mrb[0].mxu0 %v6286
  %v6812 = vpop.f32.mrb[0].mxu0
  %v6813 = vadd.f32 0.0, %v6812
  %v6814 = vpop.f32.mrb[0].mxu0
  %v6815 = vadd.f32 0.0, %v6814
  %v6816 = vpop.f32.mrb[0].mxu0
  %v6817 = vadd.f32 0.0, %v6816
  %v6818 = vpop.f32.mrb[0].mxu0
  %v6819 = vadd.f32 0.0, %v6818
  %6820 = vmatprep.mubr.bf16.mxu0 %v6464
  %6821 = vmatmul.mubr.bf16.gmra.mrb[0].mxu0 %v6288
  %v6822 = vpop.f32.mrb[0].mxu0
  %v6823 = vadd.f32 0.0, %v6822
  %v6824 = vpop.f32.mrb[0].mxu0
  %v6825 = vadd.f32 0.0, %v6824
  %v6826 = vpop.f32.mrb[0].mxu0
  %v6827 = vadd.f32 0.0, %v6826
  %v6828 = vpop.f32.mrb[0].mxu0
  %v6829 = vadd.f32 0.0, %v6828
  %6830 = vmatprep.mubr.bf16.mxu0 %v6467
  %6831 = vmatmul.mubr.bf16.gmra.mrb[0].mxu0 %v6290
  %v6832 = vpop.f32.mrb[0].mxu0
  %v6833 = vadd.f32 0.0, %v6832
  %v6834 = vpop.f32.mrb[0].mxu0
  %v6835 = vadd.f32 0.0, %v6834
  %v6836 = vpop.f32.mrb[0].mxu0
  %v6837 = vadd.f32 0.0, %v6836
  %v6838 = vpop.f32.mrb[0].mxu0
  %v6839 = vadd.f32 0.0, %v6838
  %6840 = vmatprep.mubr.bf16.mxu0 %v6470
  %6841 = vmatmul.mubr.bf16.gmra.mrb[0].mxu0 %v6292
  %v6842 = vpop.f32.mrb[0].mxu0
  %v6843 = vadd.f32 0.0, %v6842
  %v6844 = vpop.f32.mrb[0].mxu0
  %v6845 = vadd.f32 0.0, %v6844
  %v6846 = vpop.f32.mrb[0].mxu0
  %v6847 = vadd.f32 0.0, %v6846
  %v6848 = vpop.f32.mrb[0].mxu0
  %v6849 = vadd.f32 0.0, %v6848
  %6850 = vmatprep.mubr.bf16.mxu0 %v6473
  %6851 = vmatmul.mubr.bf16.gmra.mrb[0].mxu0 %v6294
  %v6852 = vpop.f32.mrb[0].mxu0
  %v6853 = vadd.f32 0.0, %v6852
  %v6854 = vpop.f32.mrb[0].mxu0
  %v6855 = vadd.f32 0.0, %v6854
  %v6856 = vpop.f32.mrb[0].mxu0
  %v6857 = vadd.f32 0.0, %v6856
  %v6858 = vpop.f32.mrb[0].mxu0
  %v6859 = vadd.f32 0.0, %v6858
  %6860 = vmatprep.mubr.bf16.mxu0 %v6476
  %6861 = vmatmul.mubr.bf16.gmra.mrb[0].mxu0 %v6296
  %v6862 = vpop.f32.mrb[0].mxu0
  %v6863 = vadd.f32 0.0, %v6862
  %v6864 = vpop.f32.mrb[0].mxu0
  %v6865 = vadd.f32 0.0, %v6864
  %v6866 = vpop.f32.mrb[0].mxu0
  %v6867 = vadd.f32 0.0, %v6866
  %v6868 = vpop.f32.mrb[0].mxu0
  %v6869 = vadd.f32 0.0, %v6868
  %6870 = vmatprep.mubr.bf16.mxu0 %v6479
  %6871 = vmatmul.mubr.bf16.gmra.mrb[0].mxu0 %v6298
  %v6872 = vpop.f32.mrb[0].mxu0
  %v6873 = vadd.f32 0.0, %v6872
  %v6874 = vpop.f32.mrb[0].mxu0
  %v6875 = vadd.f32 0.0, %v6874
  %v6876 = vpop.f32.mrb[0].mxu0
  %v6877 = vadd.f32 0.0, %v6876
  %v6878 = vpop.f32.mrb[0].mxu0
  %v6879 = vadd.f32 0.0, %v6878
  %6880 = vmatprep.mubr.bf16.mxu0 %v6482
  %6881 = vmatmul.mubr.bf16.gmra.mrb[0].mxu0 %v6300
  %v6882 = vpop.f32.mrb[0].mxu0
  %v6883 = vadd.f32 0.0, %v6882
  %v6884 = vpop.f32.mrb[0].mxu0
  %v6885 = vadd.f32 0.0, %v6884
  %v6886 = vpop.f32.mrb[0].mxu0
  %v6887 = vadd.f32 0.0, %v6886
  %v6888 = vpop.f32.mrb[0].mxu0
  %v6889 = vadd.f32 0.0, %v6888
  %6890 = vmatprep.mubr.bf16.mxu0 %v6485
  %6891 = vmatmul.mubr.bf16.gmra.mrb[0].mxu0 %v6302
  %v6892 = vpop.f32.mrb[0].mxu0
  %v6893 = vadd.f32 0.0, %v6892
  %v6894 = vpop.f32.mrb[0].mxu0
  %v6895 = vadd.f32 0.0, %v6894
  %v6896 = vpop.f32.mrb[0].mxu0
  %v6897 = vadd.f32 0.0, %v6896
  %v6898 = vpop.f32.mrb[0].mxu0
  %v6899 = vadd.f32 0.0, %v6898
  %6900 = vmatprep.mubr.bf16.mxu0 %v6488
  %6901 = vmatmul.mubr.bf16.gmra.mrb[0].mxu0 %v6304
  %v6902 = vpop.f32.mrb[0].mxu0
  %v6903 = vadd.f32 0.0, %v6902
  %v6904 = vpop.f32.mrb[0].mxu0
  %v6905 = vadd.f32 0.0, %v6904
  %v6906 = vpop.f32.mrb[0].mxu0
  %v6907 = vadd.f32 0.0, %v6906
  %v6908 = vpop.f32.mrb[0].mxu0
  %v6909 = vadd.f32 0.0, %v6908
  %6910 = vmatprep.mubr.bf16.mxu0 %v6491
  %6911 = vmatmul.mubr.bf16.gmra.mrb[0].mxu0 %v6306
  %v6912 = vpop.f32.mrb[0].mxu0
  %v6913 = vadd.f32 0.0, %v6912
  %v6914 = vpop.f32.mrb[0].mxu0
  %v6915 = vadd.f32 0.0, %v6914
  %v6916 = vpop.f32.mrb[0].mxu0
  %v6917 = vadd.f32 0.0, %v6916
  %v6918 = vpop.f32.mrb[0].mxu0
  %v6919 = vadd.f32 0.0, %v6918
  %6920 = vmatprep.mubr.bf16.mxu0 %v6494
  %6921 = vmatmul.mubr.bf16.gmra.mrb[0].mxu0 %v6308
  %v6922 = vpop.f32.mrb[0].mxu0
  %v6923 = vadd.f32 0.0, %v6922
  %v6924 = vpop.f32.mrb[0].mxu0
  %v6925 = vadd.f32 0.0, %v6924
  %v6926 = vpop.f32.mrb[0].mxu0
  %v6927 = vadd.f32 0.0, %v6926
  %v6928 = vpop.f32.mrb[0].mxu0
  %v6929 = vadd.f32 0.0, %v6928
  %6930 = vmatprep.mubr.bf16.mxu0 %v6497
  %6931 = vmatmul.mubr.bf16.gmra.mrb[0].mxu0 %v6310
  %v6932 = vpop.f32.mrb[0].mxu0
  %v6933 = vadd.f32 0.0, %v6932
  %v6934 = vpop.f32.mrb[0].mxu0
  %v6935 = vadd.f32 0.0, %v6934
  %v6936 = vpop.f32.mrb[0].mxu0
  %v6937 = vadd.f32 0.0, %v6936
  %v6938 = vpop.f32.mrb[0].mxu0
  %v6939 = vadd.f32 0.0, %v6938
  %6940 = vmatprep.mubr.bf16.mxu0 %v6500
  %6941 = vmatmul.mubr.bf16.gmra.mrb[0].mxu0 %v6312
  %v6942 = vpop.f32.mrb[0].mxu0
  %v6943 = vadd.f32 0.0, %v6942
  %v6944 = vpop.f32.mrb[0].mxu0
  %v6945 = vadd.f32 0.0, %v6944
  %v6946 = vpop.f32.mrb[0].mxu0
  %v6947 = vadd.f32 0.0, %v6946
  %v6948 = vpop.f32.mrb[0].mxu0
  %v6949 = vadd.f32 0.0, %v6948
  %6950 = vmatprep.mubr.bf16.mxu0 %v6503
  %6951 = vmatmul.mubr.bf16.gmra.mrb[0].mxu0 %v6314
  %v6952 = vpop.f32.mrb[0].mxu0
  %v6953 = vadd.f32 0.0, %v6952
  %v6954 = vpop.f32.mrb[0].mxu0
  %v6955 = vadd.f32 0.0, %v6954
  %v6956 = vpop.f32.mrb[0].mxu0
  %v6957 = vadd.f32 0.0, %v6956
  %v6958 = vpop.f32.mrb[0].mxu0
  %v6959 = vadd.f32 0.0, %v6958
  %6960 = vmatprep.mubr.bf16.mxu0 %v6506
  %6961 = vmatmul.mubr.bf16.gmra.mrb[0].mxu0 %v6316
  %v6962 = vpop.f32.mrb[0].mxu0
  %v6963 = vadd.f32 0.0, %v6962
  %v6964 = vpop.f32.mrb[0].mxu0
  %v6965 = vadd.f32 0.0, %v6964
  %v6966 = vpop.f32.mrb[0].mxu0
  %v6967 = vadd.f32 0.0, %v6966
  %v6968 = vpop.f32.mrb[0].mxu0
  %v6969 = vadd.f32 0.0, %v6968
  %6970 = vmatprep.mubr.bf16.mxu0 %v6509
  %6971 = vmatmul.mubr.bf16.gmra.mrb[0].mxu0 %v6318
  %v6972 = vpop.f32.mrb[0].mxu0
  %v6973 = vadd.f32 0.0, %v6972
  %v6974 = vpop.f32.mrb[0].mxu0
  %v6975 = vadd.f32 0.0, %v6974
  %v6976 = vpop.f32.mrb[0].mxu0
  %v6977 = vadd.f32 0.0, %v6976
  %v6978 = vpop.f32.mrb[0].mxu0
  %v6979 = vadd.f32 0.0, %v6978
  %6980 = vmatprep.mubr.bf16.mxu0 %v6512
  %6981 = vmatmul.mubr.bf16.gmra.mrb[0].mxu0 %v6320
  %v6982 = vpop.f32.mrb[0].mxu0
  %v6983 = vadd.f32 0.0, %v6982
  %v6984 = vpop.f32.mrb[0].mxu0
  %v6985 = vadd.f32 0.0, %v6984
  %v6986 = vpop.f32.mrb[0].mxu0
  %v6987 = vadd.f32 0.0, %v6986
  %v6988 = vpop.f32.mrb[0].mxu0
  %v6989 = vadd.f32 0.0, %v6988
  %6990 = vmatprep.mubr.bf16.mxu0 %v6515
  %6991 = vmatmul.mubr.bf16.gmra.mrb[0].mxu0 %v6322
  %v6992 = vpop.f32.mrb[0].mxu0
  %v6993 = vadd.f32 0.0, %v6992
  %v6994 = vpop.f32.mrb[0].mxu0
  %v6995 = vadd.f32 0.0, %v6994
  %v6996 = vpop.f32.mrb[0].mxu0
  %v6997 = vadd.f32 0.0, %v6996
  %v6998 = vpop.f32.mrb[0].mxu0
  %v6999 = vadd.f32 0.0, %v6998
  %7000 = vmatprep.mubr.bf16.mxu0 %v6518
  %7001 = vmatmul.mubr.bf16.gmra.mrb[0].mxu0 %v6324
  %v7002 = vpop.f32.mrb[0].mxu0
  %v7003 = vadd.f32 0.0, %v7002
  %v7004 = vpop.f32.mrb[0].mxu0
  %v7005 = vadd.f32 0.0, %v7004
  %v7006 = vpop.f32.mrb[0].mxu0
  %v7007 = vadd.f32 0.0, %v7006
  %v7008 = vpop.f32.mrb[0].mxu0
  %v7009 = vadd.f32 0.0, %v7008
  %7010 = vmatprep.mubr.bf16.mxu0 %v6521
  %7011 = vmatmul.mubr.bf16.gmra.mrb[0].mxu0 %v6326
  %v7012 = vpop.f32.mrb[0].mxu0
  %v7013 = vadd.f32 0.0, %v7012
  %v7014 = vpop.f32.mrb[0].mxu0
  %v7015 = vadd.f32 0.0, %v7014
  %v7016 = vpop.f32.mrb[0].mxu0
  %v7017 = vadd.f32 0.0, %v7016
  %v7018 = vpop.f32.mrb[0].mxu0
  %v7019 = vadd.f32 0.0, %v7018
  %7020 = vmatprep.mubr.bf16.mxu0 %v6524
  %7021 = vmatmul.mubr.bf16.gmra.mrb[0].mxu0 %v6328
  %v7022 = vpop.f32.mrb[0].mxu0
  %v7023 = vadd.f32 0.0, %v7022
  %v7024 = vpop.f32.mrb[0].mxu0
  %v7025 = vadd.f32 0.0, %v7024
  %v7026 = vpop.f32.mrb[0].mxu0
  %v7027 = vadd.f32 0.0, %v7026
  %v7028 = vpop.f32.mrb[0].mxu0
  %v7029 = vadd.f32 0.0, %v7028
  %7030 = vmatprep.mubr.bf16.mxu0 %v6527
  %7031 = vmatmul.mubr.bf16.gmra.mrb[0].mxu0 %v6330
  %v7032 = vpop.f32.mrb[0].mxu0
  %v7033 = vadd.f32 0.0, %v7032
  %v7034 = vpop.f32.mrb[0].mxu0
  %v7035 = vadd.f32 0.0, %v7034
  %v7036 = vpop.f32.mrb[0].mxu0
  %v7037 = vadd.f32 0.0, %v7036
  %v7038 = vpop.f32.mrb[0].mxu0
  %v7039 = vadd.f32 0.0, %v7038
  %7040 = vmatprep.mubr.bf16.mxu0 %v6530
  %7041 = vmatmul.mubr.bf16.gmra.mrb[0].mxu0 %v6332
  %v7042 = vpop.f32.mrb[0].mxu0
  %v7043 = vadd.f32 0.0, %v7042
  %v7044 = vpop.f32.mrb[0].mxu0
  %v7045 = vadd.f32 0.0, %v7044
  %v7046 = vpop.f32.mrb[0].mxu0
  %v7047 = vadd.f32 0.0, %v7046
  %v7048 = vpop.f32.mrb[0].mxu0
  %v7049 = vadd.f32 0.0, %v7048
  %7050 = vmatprep.mubr.bf16.mxu0 %v6533
  %7051 = vmatmul.mubr.bf16.gmra.mrb[0].mxu0 %v6334
  %v7052 = vpop.f32.mrb[0].mxu0
  %v7053 = vadd.f32 0.0, %v7052
  %v7054 = vpop.f32.mrb[0].mxu0
  %v7055 = vadd.f32 0.0, %v7054
  %v7056 = vpop.f32.mrb[0].mxu0
  %v7057 = vadd.f32 0.0, %v7056
  %v7058 = vpop.f32.mrb[0].mxu0
  %v7059 = vadd.f32 0.0, %v7058
  %7060 = vmatprep.mubr.bf16.mxu0 %v6536
  %7061 = vmatmul.mubr.bf16.gmra.mrb[0].mxu0 %v6336
  %v7062 = vpop.f32.mrb[0].mxu0
  %v7063 = vadd.f32 0.0, %v7062
  %v7064 = vpop.f32.mrb[0].mxu0
  %v7065 = vadd.f32 0.0, %v7064
  %v7066 = vpop.f32.mrb[0].mxu0
  %v7067 = vadd.f32 0.0, %v7066
  %v7068 = vpop.f32.mrb[0].mxu0
  %v7069 = vadd.f32 0.0, %v7068
  %7070 = vdwg.mxu0
  %v7071 = vmax.f32 %v6573, %v6575
  %v7072 = vmax.f32 %v6577, %v6579
  %v7073 = vmax.f32 %v6583, %v6585
  %v7074 = vmax.f32 %v6587, %v6589
  %v7075 = vmax.f32 %v6593, %v6595
  %v7076 = vmax.f32 %v6597, %v6599
  %v7077 = vmax.f32 %v6603, %v6605
  %v7078 = vmax.f32 %v6607, %v6609
  %v7079 = vmax.f32 %v6613, %v6615
  %v7080 = vmax.f32 %v6617, %v6619
  %v7081 = vmax.f32 %v6623, %v6625
  %v7082 = vmax.f32 %v6627, %v6629
  %v7083 = vmax.f32 %v6633, %v6635
  %v7084 = vmax.f32 %v6637, %v6639
  %v7085 = vmax.f32 %v6643, %v6645
  %v7086 = vmax.f32 %v6647, %v6649
  %v7087 = vmax.f32 %v6653, %v6655
  %v7088 = vmax.f32 %v6657, %v6659
  %v7089 = vmax.f32 %v6663, %v6665
  %v7090 = vmax.f32 %v6667, %v6669
  %v7091 = vmax.f32 %v6673, %v6675
  %v7092 = vmax.f32 %v6677, %v6679
  %v7093 = vmax.f32 %v6683, %v6685
  %v7094 = vmax.f32 %v6687, %v6689
  %v7095 = vmax.f32 %v6693, %v6695
  %v7096 = vmax.f32 %v6697, %v6699
  %v7097 = vmax.f32 %v6703, %v6705
  %v7098 = vmax.f32 %v6707, %v6709
  %v7099 = vmax.f32 %v6713, %v6715
  %v7100 = vmax.f32 %v6717, %v6719
  %v7101 = vmax.f32 %v6723, %v6725
  %v7102 = vmax.f32 %v6727, %v6729
  %v7103 = vmax.f32 %v6733, %v6735
  %v7104 = vmax.f32 %v6737, %v6739
  %v7105 = vmax.f32 %v6743, %v6745
  %v7106 = vmax.f32 %v6747, %v6749
  %v7107 = vmax.f32 %v6753, %v6755
  %v7108 = vmax.f32 %v6757, %v6759
  %v7109 = vmax.f32 %v6763, %v6765
  %v7110 = vmax.f32 %v6767, %v6769
  %v7111 = vmax.f32 %v6773, %v6775
  %v7112 = vmax.f32 %v6777, %v6779
  %v7113 = vmax.f32 %v6783, %v6785
  %v7114 = vmax.f32 %v6787, %v6789
  %v7115 = vmax.f32 %v6793, %v6795
  %v7116 = vmax.f32 %v6797, %v6799
  %v7117 = vmax.f32 %v6803, %v6805
  %v7118 = vmax.f32 %v6807, %v6809
  %v7119 = vmax.f32 %v6813, %v6815
  %v7120 = vmax.f32 %v6817, %v6819
  %v7121 = vmax.f32 %v6823, %v6825
  %v7122 = vmax.f32 %v6827, %v6829
  %v7123 = vmax.f32 %v6833, %v6835
  %v7124 = vmax.f32 %v6837, %v6839
  %v7125 = vmax.f32 %v6843, %v6845
  %v7126 = vmax.f32 %v6847, %v6849
  %v7127 = vmax.f32 %v6853, %v6855
  %v7128 = vmax.f32 %v6857, %v6859
  %v7129 = vmax.f32 %v6863, %v6865
  %v7130 = vmax.f32 %v6867, %v6869
  %v7131 = vmax.f32 %v6873, %v6875
  %v7132 = vmax.f32 %v6877, %v6879
  %v7133 = vmax.f32 %v6883, %v6885
  %v7134 = vmax.f32 %v6887, %v6889
  %v7135 = vmax.f32 %v6893, %v6895
  %v7136 = vmax.f32 %v6897, %v6899
  %v7137 = vmax.f32 %v6903, %v6905
  %v7138 = vmax.f32 %v6907, %v6909
  %v7139 = vmax.f32 %v6913, %v6915
  %v7140 = vmax.f32 %v6917, %v6919
  %v7141 = vmax.f32 %v6923, %v6925
  %v7142 = vmax.f32 %v6927, %v6929
  %v7143 = vmax.f32 %v6933, %v6935
  %v7144 = vmax.f32 %v6937, %v6939
  %v7145 = vmax.f32 %v6943, %v6945
  %v7146 = vmax.f32 %v6947, %v6949
  %v7147 = vmax.f32 %v6953, %v6955
  %v7148 = vmax.f32 %v6957, %v6959
  %v7149 = vmax.f32 %v6963, %v6965
  %v7150 = vmax.f32 %v6967, %v6969
  %v7151 = vmax.f32 %v6973, %v6975
  %v7152 = vmax.f32 %v6977, %v6979
  %v7153 = vmax.f32 %v6983, %v6985
  %v7154 = vmax.f32 %v6987, %v6989
  %v7155 = vmax.f32 %v6993, %v6995
  %v7156 = vmax.f32 %v6997, %v6999
  %v7157 = vmax.f32 %v7003, %v7005
  %v7158 = vmax.f32 %v7007, %v7009
  %v7159 = vmax.f32 %v7013, %v7015
  %v7160 = vmax.f32 %v7017, %v7019
  %v7161 = vmax.f32 %v7023, %v7025
  %v7162 = vmax.f32 %v7027, %v7029
  %v7163 = vmax.f32 %v7033, %v7035
  %v7164 = vmax.f32 %v7037, %v7039
  %v7165 = vmax.f32 %v7043, %v7045
  %v7166 = vmax.f32 %v7047, %v7049
  %v7167 = vmax.f32 %v7053, %v7055
  %v7168 = vmax.f32 %v7057, %v7059
  %v7169 = vmax.f32 %v7063, %v7065
  %v7170 = vmax.f32 %v7067, %v7069
  %7271 = vrot.lane.b32.xlu0 %v7071, 64
  %v7272 = vpop.permute.xlu0 %7271
  %7273 = vrot.lane.b32.xlu0 %v7072, 64
  %v7274 = vpop.permute.xlu0 %7273
  %7275 = vrot.lane.b32.xlu0 %v7073, 64
  %v7276 = vpop.permute.xlu0 %7275
  %7277 = vrot.lane.b32.xlu0 %v7074, 64
  %v7278 = vpop.permute.xlu0 %7277
  %7279 = vrot.lane.b32.xlu0 %v7075, 64
  %v7280 = vpop.permute.xlu0 %7279
  %7281 = vrot.lane.b32.xlu0 %v7076, 64
  %v7282 = vpop.permute.xlu0 %7281
  %7283 = vrot.lane.b32.xlu0 %v7077, 64
  %v7284 = vpop.permute.xlu0 %7283
  %7285 = vrot.lane.b32.xlu0 %v7078, 64
  %v7286 = vpop.permute.xlu0 %7285
  %7287 = vrot.lane.b32.xlu0 %v7079, 64
  %v7288 = vpop.permute.xlu0 %7287
  %7289 = vrot.lane.b32.xlu0 %v7080, 64
  %v7290 = vpop.permute.xlu0 %7289
  %7291 = vrot.lane.b32.xlu0 %v7081, 64
  %v7292 = vpop.permute.xlu0 %7291
  %7293 = vrot.lane.b32.xlu0 %v7082, 64
  %v7294 = vpop.permute.xlu0 %7293
  %7295 = vrot.lane.b32.xlu0 %v7083, 64
  %v7296 = vpop.permute.xlu0 %7295
  %7297 = vrot.lane.b32.xlu0 %v7084, 64
  %v7298 = vpop.permute.xlu0 %7297
  %7299 = vrot.lane.b32.xlu0 %v7085, 64
  %v7300 = vpop.permute.xlu0 %7299
  %7301 = vrot.lane.b32.xlu0 %v7086, 64
  %v7302 = vpop.permute.xlu0 %7301
  %7303 = vrot.lane.b32.xlu0 %v7087, 64
  %v7304 = vpop.permute.xlu0 %7303
  %7305 = vrot.lane.b32.xlu0 %v7088, 64
  %v7306 = vpop.permute.xlu0 %7305
  %7307 = vrot.lane.b32.xlu0 %v7089, 64
  %v7308 = vpop.permute.xlu0 %7307
  %7309 = vrot.lane.b32.xlu0 %v7090, 64
  %v7310 = vpop.permute.xlu0 %7309
  %7311 = vrot.lane.b32.xlu0 %v7091, 64
  %v7312 = vpop.permute.xlu0 %7311
  %7313 = vrot.lane.b32.xlu0 %v7092, 64
  %v7314 = vpop.permute.xlu0 %7313
  %7315 = vrot.lane.b32.xlu0 %v7093, 64
  %v7316 = vpop.permute.xlu0 %7315
  %7317 = vrot.lane.b32.xlu0 %v7094, 64
  %v7318 = vpop.permute.xlu0 %7317
  %7319 = vrot.lane.b32.xlu0 %v7095, 64
  %v7320 = vpop.permute.xlu0 %7319
  %7321 = vrot.lane.b32.xlu0 %v7096, 64
  %v7322 = vpop.permute.xlu0 %7321
  %7323 = vrot.lane.b32.xlu0 %v7097, 64
  %v7324 = vpop.permute.xlu0 %7323
  %7325 = vrot.lane.b32.xlu0 %v7098, 64
  %v7326 = vpop.permute.xlu0 %7325
  %7327 = vrot.lane.b32.xlu0 %v7099, 64
  %v7328 = vpop.permute.xlu0 %7327
  %7329 = vrot.lane.b32.xlu0 %v7100, 64
  %v7330 = vpop.permute.xlu0 %7329
  %7331 = vrot.lane.b32.xlu0 %v7101, 64
  %v7332 = vpop.permute.xlu0 %7331
  %7333 = vrot.lane.b32.xlu0 %v7102, 64
  %v7334 = vpop.permute.xlu0 %7333
  %7335 = vrot.lane.b32.xlu0 %v7103, 64
  %v7336 = vpop.permute.xlu0 %7335
  %7337 = vrot.lane.b32.xlu0 %v7104, 64
  %v7338 = vpop.permute.xlu0 %7337
  %7339 = vrot.lane.b32.xlu0 %v7105, 64
  %v7340 = vpop.permute.xlu0 %7339
  %7341 = vrot.lane.b32.xlu0 %v7106, 64
  %v7342 = vpop.permute.xlu0 %7341
  %7343 = vrot.lane.b32.xlu0 %v7107, 64
  %v7344 = vpop.permute.xlu0 %7343
  %7345 = vrot.lane.b32.xlu0 %v7108, 64
  %v7346 = vpop.permute.xlu0 %7345
  %7347 = vrot.lane.b32.xlu0 %v7109, 64
  %v7348 = vpop.permute.xlu0 %7347
  %7349 = vrot.lane.b32.xlu0 %v7110, 64
  %v7350 = vpop.permute.xlu0 %7349
  %7351 = vrot.lane.b32.xlu0 %v7111, 64
  %v7352 = vpop.permute.xlu0 %7351
  %7353 = vrot.lane.b32.xlu0 %v7112, 64
  %v7354 = vpop.permute.xlu0 %7353
  %7355 = vrot.lane.b32.xlu0 %v7113, 64
  %v7356 = vpop.permute.xlu0 %7355
  %7357 = vrot.lane.b32.xlu0 %v7114, 64
  %v7358 = vpop.permute.xlu0 %7357
  %7359 = vrot.lane.b32.xlu0 %v7115, 64
  %v7360 = vpop.permute.xlu0 %7359
  %7361 = vrot.lane.b32.xlu0 %v7116, 64
  %v7362 = vpop.permute.xlu0 %7361
  %7363 = vrot.lane.b32.xlu0 %v7117, 64
  %v7364 = vpop.permute.xlu0 %7363
  %7365 = vrot.lane.b32.xlu0 %v7118, 64
  %v7366 = vpop.permute.xlu0 %7365
  %7367 = vrot.lane.b32.xlu0 %v7119, 64
  %v7368 = vpop.permute.xlu0 %7367
  %7369 = vrot.lane.b32.xlu0 %v7120, 64
  %v7370 = vpop.permute.xlu0 %7369
  %7371 = vrot.lane.b32.xlu0 %v7121, 64
  %v7372 = vpop.permute.xlu0 %7371
  %7373 = vrot.lane.b32.xlu0 %v7122, 64
  %v7374 = vpop.permute.xlu0 %7373
  %7375 = vrot.lane.b32.xlu0 %v7123, 64
  %v7376 = vpop.permute.xlu0 %7375
  %7377 = vrot.lane.b32.xlu0 %v7124, 64
  %v7378 = vpop.permute.xlu0 %7377
  %7379 = vrot.lane.b32.xlu0 %v7125, 64
  %v7380 = vpop.permute.xlu0 %7379
  %7381 = vrot.lane.b32.xlu0 %v7126, 64
  %v7382 = vpop.permute.xlu0 %7381
  %7383 = vrot.lane.b32.xlu0 %v7127, 64
  %v7384 = vpop.permute.xlu0 %7383
  %7385 = vrot.lane.b32.xlu0 %v7128, 64
  %v7386 = vpop.permute.xlu0 %7385
  %7387 = vrot.lane.b32.xlu0 %v7129, 64
  %v7388 = vpop.permute.xlu0 %7387
  %7389 = vrot.lane.b32.xlu0 %v7130, 64
  %v7390 = vpop.permute.xlu0 %7389
  %7391 = vrot.lane.b32.xlu0 %v7131, 64
  %v7392 = vpop.permute.xlu0 %7391
  %7393 = vrot.lane.b32.xlu0 %v7132, 64
  %v7394 = vpop.permute.xlu0 %7393
  %7395 = vrot.lane.b32.xlu0 %v7133, 64
  %v7396 = vpop.permute.xlu0 %7395
  %7397 = vrot.lane.b32.xlu0 %v7134, 64
  %v7398 = vpop.permute.xlu0 %7397
  %7399 = vrot.lane.b32.xlu0 %v7135, 64
  %v7400 = vpop.permute.xlu0 %7399
  %7401 = vrot.lane.b32.xlu0 %v7136, 64
  %v7402 = vpop.permute.xlu0 %7401
  %7403 = vrot.lane.b32.xlu0 %v7137, 64
  %v7404 = vpop.permute.xlu0 %7403
  %7405 = vrot.lane.b32.xlu0 %v7138, 64
  %v7406 = vpop.permute.xlu0 %7405
  %7407 = vrot.lane.b32.xlu0 %v7139, 64
  %v7408 = vpop.permute.xlu0 %7407
  %7409 = vrot.lane.b32.xlu0 %v7140, 64
  %v7410 = vpop.permute.xlu0 %7409
  %7411 = vrot.lane.b32.xlu0 %v7141, 64
  %v7412 = vpop.permute.xlu0 %7411
  %7413 = vrot.lane.b32.xlu0 %v7142, 64
  %v7414 = vpop.permute.xlu0 %7413
  %7415 = vrot.lane.b32.xlu0 %v7143, 64
  %v7416 = vpop.permute.xlu0 %7415
  %7417 = vrot.lane.b32.xlu0 %v7144, 64
  %v7418 = vpop.permute.xlu0 %7417
  %7419 = vrot.lane.b32.xlu0 %v7145, 64
  %v7420 = vpop.permute.xlu0 %7419
  %7421 = vrot.lane.b32.xlu0 %v7146, 64
  %v7422 = vpop.permute.xlu0 %7421
  %7423 = vrot.lane.b32.xlu0 %v7147, 64
  %v7424 = vpop.permute.xlu0 %7423
  %7425 = vrot.lane.b32.xlu0 %v7148, 64
  %v7426 = vpop.permute.xlu0 %7425
  %7427 = vrot.lane.b32.xlu0 %v7149, 64
  %v7428 = vpop.permute.xlu0 %7427
  %7429 = vrot.lane.b32.xlu0 %v7150, 64
  %v7430 = vpop.permute.xlu0 %7429
  %7431 = vrot.lane.b32.xlu0 %v7151, 64
  %v7432 = vpop.permute.xlu0 %7431
  %7433 = vrot.lane.b32.xlu0 %v7152, 64
  %v7434 = vpop.permute.xlu0 %7433
  %7435 = vrot.lane.b32.xlu0 %v7153, 64
  %v7436 = vpop.permute.xlu0 %7435
  %7437 = vrot.lane.b32.xlu0 %v7154, 64
  %v7438 = vpop.permute.xlu0 %7437
  %7439 = vrot.lane.b32.xlu0 %v7155, 64
  %v7440 = vpop.permute.xlu0 %7439
  %7441 = vrot.lane.b32.xlu0 %v7156, 64
  %v7442 = vpop.permute.xlu0 %7441
  %7443 = vrot.lane.b32.xlu0 %v7157, 64
  %v7444 = vpop.permute.xlu0 %7443
  %7445 = vrot.lane.b32.xlu0 %v7158, 64
  %v7446 = vpop.permute.xlu0 %7445
  %7447 = vrot.lane.b32.xlu0 %v7159, 64
  %v7448 = vpop.permute.xlu0 %7447
  %7449 = vrot.lane.b32.xlu0 %v7160, 64
  %v7450 = vpop.permute.xlu0 %7449
  %7451 = vrot.lane.b32.xlu0 %v7161, 64
  %v7452 = vpop.permute.xlu0 %7451
  %7453 = vrot.lane.b32.xlu0 %v7162, 64
  %v7454 = vpop.permute.xlu0 %7453
  %7455 = vrot.lane.b32.xlu0 %v7163, 64
  %v7456 = vpop.permute.xlu0 %7455
  %7457 = vrot.lane.b32.xlu0 %v7164, 64
  %v7458 = vpop.permute.xlu0 %7457
  %7459 = vrot.lane.b32.xlu0 %v7165, 64
  %v7460 = vpop.permute.xlu0 %7459
  %7461 = vrot.lane.b32.xlu0 %v7166, 64
  %v7462 = vpop.permute.xlu0 %7461
  %7463 = vrot.lane.b32.xlu0 %v7167, 64
  %v7464 = vpop.permute.xlu0 %7463
  %7465 = vrot.lane.b32.xlu0 %v7168, 64
  %v7466 = vpop.permute.xlu0 %7465
  %7467 = vrot.lane.b32.xlu0 %v7169, 64
  %v7468 = vpop.permute.xlu0 %7467
  %7469 = vrot.lane.b32.xlu0 %v7170, 64
  %v7470 = vpop.permute.xlu0 %7469
  %v7571 = vmax.f32 %v7071, %v7272
  %v7572 = vmax.f32 %v7072, %v7274
  %v7573 = vmax.f32 %v7073, %v7276
  %v7574 = vmax.f32 %v7074, %v7278
  %v7575 = vmax.f32 %v7075, %v7280
  %v7576 = vmax.f32 %v7076, %v7282
  %v7577 = vmax.f32 %v7077, %v7284
  %v7578 = vmax.f32 %v7078, %v7286
  %v7579 = vmax.f32 %v7079, %v7288
  %v7580 = vmax.f32 %v7080, %v7290
  %v7581 = vmax.f32 %v7081, %v7292
  %v7582 = vmax.f32 %v7082, %v7294
  %v7583 = vmax.f32 %v7083, %v7296
  %v7584 = vmax.f32 %v7084, %v7298
  %v7585 = vmax.f32 %v7085, %v7300
  %v7586 = vmax.f32 %v7086, %v7302
  %v7587 = vmax.f32 %v7087, %v7304
  %v7588 = vmax.f32 %v7088, %v7306
  %v7589 = vmax.f32 %v7089, %v7308
  %v7590 = vmax.f32 %v7090, %v7310
  %v7591 = vmax.f32 %v7091, %v7312
  %v7592 = vmax.f32 %v7092, %v7314
  %v7593 = vmax.f32 %v7093, %v7316
  %v7594 = vmax.f32 %v7094, %v7318
  %v7595 = vmax.f32 %v7095, %v7320
  %v7596 = vmax.f32 %v7096, %v7322
  %v7597 = vmax.f32 %v7097, %v7324
  %v7598 = vmax.f32 %v7098, %v7326
  %v7599 = vmax.f32 %v7099, %v7328
  %v7600 = vmax.f32 %v7100, %v7330
  %v7601 = vmax.f32 %v7101, %v7332
  %v7602 = vmax.f32 %v7102, %v7334
  %v7603 = vmax.f32 %v7103, %v7336
  %v7604 = vmax.f32 %v7104, %v7338
  %v7605 = vmax.f32 %v7105, %v7340
  %v7606 = vmax.f32 %v7106, %v7342
  %v7607 = vmax.f32 %v7107, %v7344
  %v7608 = vmax.f32 %v7108, %v7346
  %v7609 = vmax.f32 %v7109, %v7348
  %v7610 = vmax.f32 %v7110, %v7350
  %v7611 = vmax.f32 %v7111, %v7352
  %v7612 = vmax.f32 %v7112, %v7354
  %v7613 = vmax.f32 %v7113, %v7356
  %v7614 = vmax.f32 %v7114, %v7358
  %v7615 = vmax.f32 %v7115, %v7360
  %v7616 = vmax.f32 %v7116, %v7362
  %v7617 = vmax.f32 %v7117, %v7364
  %v7618 = vmax.f32 %v7118, %v7366
  %v7619 = vmax.f32 %v7119, %v7368
  %v7620 = vmax.f32 %v7120, %v7370
  %v7621 = vmax.f32 %v7121, %v7372
  %v7622 = vmax.f32 %v7122, %v7374
  %v7623 = vmax.f32 %v7123, %v7376
  %v7624 = vmax.f32 %v7124, %v7378
  %v7625 = vmax.f32 %v7125, %v7380
  %v7626 = vmax.f32 %v7126, %v7382
  %v7627 = vmax.f32 %v7127, %v7384
  %v7628 = vmax.f32 %v7128, %v7386
  %v7629 = vmax.f32 %v7129, %v7388
  %v7630 = vmax.f32 %v7130, %v7390
  %v7631 = vmax.f32 %v7131, %v7392
  %v7632 = vmax.f32 %v7132, %v7394
  %v7633 = vmax.f32 %v7133, %v7396
  %v7634 = vmax.f32 %v7134, %v7398
  %v7635 = vmax.f32 %v7135, %v7400
  %v7636 = vmax.f32 %v7136, %v7402
  %v7637 = vmax.f32 %v7137, %v7404
  %v7638 = vmax.f32 %v7138, %v7406
  %v7639 = vmax.f32 %v7139, %v7408
  %v7640 = vmax.f32 %v7140, %v7410
  %v7641 = vmax.f32 %v7141, %v7412
  %v7642 = vmax.f32 %v7142, %v7414
  %v7643 = vmax.f32 %v7143, %v7416
  %v7644 = vmax.f32 %v7144, %v7418
  %v7645 = vmax.f32 %v7145, %v7420
  %v7646 = vmax.f32 %v7146, %v7422
  %v7647 = vmax.f32 %v7147, %v7424
  %v7648 = vmax.f32 %v7148, %v7426
  %v7649 = vmax.f32 %v7149, %v7428
  %v7650 = vmax.f32 %v7150, %v7430
  %v7651 = vmax.f32 %v7151, %v7432
  %v7652 = vmax.f32 %v7152, %v7434
  %v7653 = vmax.f32 %v7153, %v7436
  %v7654 = vmax.f32 %v7154, %v7438
  %v7655 = vmax.f32 %v7155, %v7440
  %v7656 = vmax.f32 %v7156, %v7442
  %v7657 = vmax.f32 %v7157, %v7444
  %v7658 = vmax.f32 %v7158, %v7446
  %v7659 = vmax.f32 %v7159, %v7448
  %v7660 = vmax.f32 %v7160, %v7450
  %v7661 = vmax.f32 %v7161, %v7452
  %v7662 = vmax.f32 %v7162, %v7454
  %v7663 = vmax.f32 %v7163, %v7456
  %v7664 = vmax.f32 %v7164, %v7458
  %v7665 = vmax.f32 %v7165, %v7460
  %v7666 = vmax.f32 %v7166, %v7462
  %v7667 = vmax.f32 %v7167, %v7464
  %v7668 = vmax.f32 %v7168, %v7466
  %v7669 = vmax.f32 %v7169, %v7468
  %v7670 = vmax.f32 %v7170, %v7470
  %v7671 = vmax.f32 %v5737, %v7571
  %v7672 = vmax.f32 %v5738, %v7572
  %v7673 = vmax.f32 %v5739, %v7573
  %v7674 = vmax.f32 %v5740, %v7574
  %v7675 = vmax.f32 %v5741, %v7575
  %v7676 = vmax.f32 %v5742, %v7576
  %v7677 = vmax.f32 %v5743, %v7577
  %v7678 = vmax.f32 %v5744, %v7578
  %v7679 = vmax.f32 %v5745, %v7579
  %v7680 = vmax.f32 %v5746, %v7580
  %v7681 = vmax.f32 %v5747, %v7581
  %v7682 = vmax.f32 %v5748, %v7582
  %v7683 = vmax.f32 %v5749, %v7583
  %v7684 = vmax.f32 %v5750, %v7584
  %v7685 = vmax.f32 %v5751, %v7585
  %v7686 = vmax.f32 %v5752, %v7586
  %v7687 = vmax.f32 %v5753, %v7587
  %v7688 = vmax.f32 %v5754, %v7588
  %v7689 = vmax.f32 %v5755, %v7589
  %v7690 = vmax.f32 %v5756, %v7590
  %v7691 = vmax.f32 %v5757, %v7591
  %v7692 = vmax.f32 %v5758, %v7592
  %v7693 = vmax.f32 %v5759, %v7593
  %v7694 = vmax.f32 %v5760, %v7594
  %v7695 = vmax.f32 %v5761, %v7595
  %v7696 = vmax.f32 %v5762, %v7596
  %v7697 = vmax.f32 %v5763, %v7597
  %v7698 = vmax.f32 %v5764, %v7598
  %v7699 = vmax.f32 %v5765, %v7599
  %v7700 = vmax.f32 %v5766, %v7600
  %v7701 = vmax.f32 %v5767, %v7601
  %v7702 = vmax.f32 %v5768, %v7602
  %v7703 = vmax.f32 %v5769, %v7603
  %v7704 = vmax.f32 %v5770, %v7604
  %v7705 = vmax.f32 %v5771, %v7605
  %v7706 = vmax.f32 %v5772, %v7606
  %v7707 = vmax.f32 %v5773, %v7607
  %v7708 = vmax.f32 %v5774, %v7608
  %v7709 = vmax.f32 %v5775, %v7609
  %v7710 = vmax.f32 %v5776, %v7610
  %v7711 = vmax.f32 %v5777, %v7611
  %v7712 = vmax.f32 %v5778, %v7612
  %v7713 = vmax.f32 %v5779, %v7613
  %v7714 = vmax.f32 %v5780, %v7614
  %v7715 = vmax.f32 %v5781, %v7615
  %v7716 = vmax.f32 %v5782, %v7616
  %v7717 = vmax.f32 %v5783, %v7617
  %v7718 = vmax.f32 %v5784, %v7618
  %v7719 = vmax.f32 %v5785, %v7619
  %v7720 = vmax.f32 %v5786, %v7620
  %v7721 = vmax.f32 %v5787, %v7621
  %v7722 = vmax.f32 %v5788, %v7622
  %v7723 = vmax.f32 %v5789, %v7623
  %v7724 = vmax.f32 %v5790, %v7624
  %v7725 = vmax.f32 %v5791, %v7625
  %v7726 = vmax.f32 %v5792, %v7626
  %v7727 = vmax.f32 %v5793, %v7627
  %v7728 = vmax.f32 %v5794, %v7628
  %v7729 = vmax.f32 %v5795, %v7629
  %v7730 = vmax.f32 %v5796, %v7630
  %v7731 = vmax.f32 %v5797, %v7631
  %v7732 = vmax.f32 %v5798, %v7632
  %v7733 = vmax.f32 %v5799, %v7633
  %v7734 = vmax.f32 %v5800, %v7634
  %v7735 = vmax.f32 %v5801, %v7635
  %v7736 = vmax.f32 %v5802, %v7636
  %v7737 = vmax.f32 %v5803, %v7637
  %v7738 = vmax.f32 %v5804, %v7638
  %v7739 = vmax.f32 %v5805, %v7639
  %v7740 = vmax.f32 %v5806, %v7640
  %v7741 = vmax.f32 %v5807, %v7641
  %v7742 = vmax.f32 %v5808, %v7642
  %v7743 = vmax.f32 %v5809, %v7643
  %v7744 = vmax.f32 %v5810, %v7644
  %v7745 = vmax.f32 %v5811, %v7645
  %v7746 = vmax.f32 %v5812, %v7646
  %v7747 = vmax.f32 %v5813, %v7647
  %v7748 = vmax.f32 %v5814, %v7648
  %v7749 = vmax.f32 %v5815, %v7649
  %v7750 = vmax.f32 %v5816, %v7650
  %v7751 = vmax.f32 %v5817, %v7651
  %v7752 = vmax.f32 %v5818, %v7652
  %v7753 = vmax.f32 %v5819, %v7653
  %v7754 = vmax.f32 %v5820, %v7654
  %v7755 = vmax.f32 %v5821, %v7655
  %v7756 = vmax.f32 %v5822, %v7656
  %v7757 = vmax.f32 %v5823, %v7657
  %v7758 = vmax.f32 %v5824, %v7658
  %v7759 = vmax.f32 %v5825, %v7659
  %v7760 = vmax.f32 %v5826, %v7660
  %v7761 = vmax.f32 %v5827, %v7661
  %v7762 = vmax.f32 %v5828, %v7662
  %v7763 = vmax.f32 %v5829, %v7663
  %v7764 = vmax.f32 %v5830, %v7664
  %v7765 = vmax.f32 %v5831, %v7665
  %v7766 = vmax.f32 %v5832, %v7666
  %v7767 = vmax.f32 %v5833, %v7667
  %v7768 = vmax.f32 %v5834, %v7668
  %v7769 = vmax.f32 %v5835, %v7669
  %v7770 = vmax.f32 %v5836, %v7670
  %v7771 = vld [vmem:[%s2] sm:$0x1]
  %v7773 = vlaneseq
  %v7774 = vshrl.u32 %v7773, 7
  %v7775 = vsub.s32 0, %v7774
  %v7776 = vrot.slane %v7771, %v7775
  %v7778 = vadd.f32 %v7671, %v7776
  %v7779 = vadd.f32 %v7672, %v7776
  %v7780 = vadd.f32 %v7673, %v7776
  %v7781 = vadd.f32 %v7674, %v7776
  %v7782 = vadd.f32 %v7675, %v7776
  %v7783 = vadd.f32 %v7676, %v7776
  %v7784 = vadd.f32 %v7677, %v7776
  %v7785 = vadd.f32 %v7678, %v7776
  %v7786 = vadd.f32 %v7679, %v7776
  %v7787 = vadd.f32 %v7680, %v7776
  %v7788 = vadd.f32 %v7681, %v7776
  %v7789 = vadd.f32 %v7682, %v7776
  %v7790 = vadd.f32 %v7683, %v7776
  %v7791 = vadd.f32 %v7684, %v7776
  %v7792 = vadd.f32 %v7685, %v7776
  %v7793 = vadd.f32 %v7686, %v7776
  %v7794 = vadd.f32 %v7687, %v7776
  %v7795 = vadd.f32 %v7688, %v7776
  %v7796 = vadd.f32 %v7689, %v7776
  %v7797 = vadd.f32 %v7690, %v7776
  %v7798 = vadd.f32 %v7691, %v7776
  %v7799 = vadd.f32 %v7692, %v7776
  %v7800 = vadd.f32 %v7693, %v7776
  %v7801 = vadd.f32 %v7694, %v7776
  %v7802 = vadd.f32 %v7695, %v7776
  %v7803 = vadd.f32 %v7696, %v7776
  %v7804 = vadd.f32 %v7697, %v7776
  %v7805 = vadd.f32 %v7698, %v7776
  %v7806 = vadd.f32 %v7699, %v7776
  %v7807 = vadd.f32 %v7700, %v7776
  %v7808 = vadd.f32 %v7701, %v7776
  %v7809 = vadd.f32 %v7702, %v7776
  %v7810 = vadd.f32 %v7703, %v7776
  %v7811 = vadd.f32 %v7704, %v7776
  %v7812 = vadd.f32 %v7705, %v7776
  %v7813 = vadd.f32 %v7706, %v7776
  %v7814 = vadd.f32 %v7707, %v7776
  %v7815 = vadd.f32 %v7708, %v7776
  %v7816 = vadd.f32 %v7709, %v7776
  %v7817 = vadd.f32 %v7710, %v7776
  %v7818 = vadd.f32 %v7711, %v7776
  %v7819 = vadd.f32 %v7712, %v7776
  %v7820 = vadd.f32 %v7713, %v7776
  %v7821 = vadd.f32 %v7714, %v7776
  %v7822 = vadd.f32 %v7715, %v7776
  %v7823 = vadd.f32 %v7716, %v7776
  %v7824 = vadd.f32 %v7717, %v7776
  %v7825 = vadd.f32 %v7718, %v7776
  %v7826 = vadd.f32 %v7719, %v7776
  %v7827 = vadd.f32 %v7720, %v7776
  %v7828 = vadd.f32 %v7721, %v7776
  %v7829 = vadd.f32 %v7722, %v7776
  %v7830 = vadd.f32 %v7723, %v7776
  %v7831 = vadd.f32 %v7724, %v7776
  %v7832 = vadd.f32 %v7725, %v7776
  %v7833 = vadd.f32 %v7726, %v7776
  %v7834 = vadd.f32 %v7727, %v7776
  %v7835 = vadd.f32 %v7728, %v7776
  %v7836 = vadd.f32 %v7729, %v7776
  %v7837 = vadd.f32 %v7730, %v7776
  %v7838 = vadd.f32 %v7731, %v7776
  %v7839 = vadd.f32 %v7732, %v7776
  %v7840 = vadd.f32 %v7733, %v7776
  %v7841 = vadd.f32 %v7734, %v7776
  %v7842 = vadd.f32 %v7735, %v7776
  %v7843 = vadd.f32 %v7736, %v7776
  %v7844 = vadd.f32 %v7737, %v7776
  %v7845 = vadd.f32 %v7738, %v7776
  %v7846 = vadd.f32 %v7739, %v7776
  %v7847 = vadd.f32 %v7740, %v7776
  %v7848 = vadd.f32 %v7741, %v7776
  %v7849 = vadd.f32 %v7742, %v7776
  %v7850 = vadd.f32 %v7743, %v7776
  %v7851 = vadd.f32 %v7744, %v7776
  %v7852 = vadd.f32 %v7745, %v7776
  %v7853 = vadd.f32 %v7746, %v7776
  %v7854 = vadd.f32 %v7747, %v7776
  %v7855 = vadd.f32 %v7748, %v7776
  %v7856 = vadd.f32 %v7749, %v7776
  %v7857 = vadd.f32 %v7750, %v7776
  %v7858 = vadd.f32 %v7751, %v7776
  %v7859 = vadd.f32 %v7752, %v7776
  %v7860 = vadd.f32 %v7753, %v7776
  %v7861 = vadd.f32 %v7754, %v7776
  %v7862 = vadd.f32 %v7755, %v7776
  %v7863 = vadd.f32 %v7756, %v7776
  %v7864 = vadd.f32 %v7757, %v7776
  %v7865 = vadd.f32 %v7758, %v7776
  %v7866 = vadd.f32 %v7759, %v7776
  %v7867 = vadd.f32 %v7760, %v7776
  %v7868 = vadd.f32 %v7761, %v7776
  %v7869 = vadd.f32 %v7762, %v7776
  %v7870 = vadd.f32 %v7763, %v7776
  %v7871 = vadd.f32 %v7764, %v7776
  %v7872 = vadd.f32 %v7765, %v7776
  %v7873 = vadd.f32 %v7766, %v7776
  %v7874 = vadd.f32 %v7767, %v7776
  %v7875 = vadd.f32 %v7768, %v7776
  %v7876 = vadd.f32 %v7769, %v7776
  %v7877 = vadd.f32 %v7770, %v7776
  %v7878 = vmax.f32 %v7778, 0.0
  %v7879 = vmax.f32 %v7779, 0.0
  %v7880 = vmax.f32 %v7780, 0.0
  %v7881 = vmax.f32 %v7781, 0.0
  %v7882 = vmax.f32 %v7782, 0.0
  %v7883 = vmax.f32 %v7783, 0.0
  %v7884 = vmax.f32 %v7784, 0.0
  %v7885 = vmax.f32 %v7785, 0.0
  %v7886 = vmax.f32 %v7786, 0.0
  %v7887 = vmax.f32 %v7787, 0.0
  %v7888 = vmax.f32 %v7788, 0.0
  %v7889 = vmax.f32 %v7789, 0.0
  %v7890 = vmax.f32 %v7790, 0.0
  %v7891 = vmax.f32 %v7791, 0.0
  %v7892 = vmax.f32 %v7792, 0.0
  %v7893 = vmax.f32 %v7793, 0.0
  %v7894 = vmax.f32 %v7794, 0.0
  %v7895 = vmax.f32 %v7795, 0.0
  %v7896 = vmax.f32 %v7796, 0.0
  %v7897 = vmax.f32 %v7797, 0.0
  %v7898 = vmax.f32 %v7798, 0.0
  %v7899 = vmax.f32 %v7799, 0.0
  %v7900 = vmax.f32 %v7800, 0.0
  %v7901 = vmax.f32 %v7801, 0.0
  %v7902 = vmax.f32 %v7802, 0.0
  %v7903 = vmax.f32 %v7803, 0.0
  %v7904 = vmax.f32 %v7804, 0.0
  %v7905 = vmax.f32 %v7805, 0.0
  %v7906 = vmax.f32 %v7806, 0.0
  %v7907 = vmax.f32 %v7807, 0.0
  %v7908 = vmax.f32 %v7808, 0.0
  %v7909 = vmax.f32 %v7809, 0.0
  %v7910 = vmax.f32 %v7810, 0.0
  %v7911 = vmax.f32 %v7811, 0.0
  %v7912 = vmax.f32 %v7812, 0.0
  %v7913 = vmax.f32 %v7813, 0.0
  %v7914 = vmax.f32 %v7814, 0.0
  %v7915 = vmax.f32 %v7815, 0.0
  %v7916 = vmax.f32 %v7816, 0.0
  %v7917 = vmax.f32 %v7817, 0.0
  %v7918 = vmax.f32 %v7818, 0.0
  %v7919 = vmax.f32 %v7819, 0.0
  %v7920 = vmax.f32 %v7820, 0.0
  %v7921 = vmax.f32 %v7821, 0.0
  %v7922 = vmax.f32 %v7822, 0.0
  %v7923 = vmax.f32 %v7823, 0.0
  %v7924 = vmax.f32 %v7824, 0.0
  %v7925 = vmax.f32 %v7825, 0.0
  %v7926 = vmax.f32 %v7826, 0.0
  %v7927 = vmax.f32 %v7827, 0.0
  %v7928 = vmax.f32 %v7828, 0.0
  %v7929 = vmax.f32 %v7829, 0.0
  %v7930 = vmax.f32 %v7830, 0.0
  %v7931 = vmax.f32 %v7831, 0.0
  %v7932 = vmax.f32 %v7832, 0.0
  %v7933 = vmax.f32 %v7833, 0.0
  %v7934 = vmax.f32 %v7834, 0.0
  %v7935 = vmax.f32 %v7835, 0.0
  %v7936 = vmax.f32 %v7836, 0.0
  %v7937 = vmax.f32 %v7837, 0.0
  %v7938 = vmax.f32 %v7838, 0.0
  %v7939 = vmax.f32 %v7839, 0.0
  %v7940 = vmax.f32 %v7840, 0.0
  %v7941 = vmax.f32 %v7841, 0.0
  %v7942 = vmax.f32 %v7842, 0.0
  %v7943 = vmax.f32 %v7843, 0.0
  %v7944 = vmax.f32 %v7844, 0.0
  %v7945 = vmax.f32 %v7845, 0.0
  %v7946 = vmax.f32 %v7846, 0.0
  %v7947 = vmax.f32 %v7847, 0.0
  %v7948 = vmax.f32 %v7848, 0.0
  %v7949 = vmax.f32 %v7849, 0.0
  %v7950 = vmax.f32 %v7850, 0.0
  %v7951 = vmax.f32 %v7851, 0.0
  %v7952 = vmax.f32 %v7852, 0.0
  %v7953 = vmax.f32 %v7853, 0.0
  %v7954 = vmax.f32 %v7854, 0.0
  %v7955 = vmax.f32 %v7855, 0.0
  %v7956 = vmax.f32 %v7856, 0.0
  %v7957 = vmax.f32 %v7857, 0.0
  %v7958 = vmax.f32 %v7858, 0.0
  %v7959 = vmax.f32 %v7859, 0.0
  %v7960 = vmax.f32 %v7860, 0.0
  %v7961 = vmax.f32 %v7861, 0.0
  %v7962 = vmax.f32 %v7862, 0.0
  %v7963 = vmax.f32 %v7863, 0.0
  %v7964 = vmax.f32 %v7864, 0.0
  %v7965 = vmax.f32 %v7865, 0.0
  %v7966 = vmax.f32 %v7866, 0.0
  %v7967 = vmax.f32 %v7867, 0.0
  %v7968 = vmax.f32 %v7868, 0.0
  %v7969 = vmax.f32 %v7869, 0.0
  %v7970 = vmax.f32 %v7870, 0.0
  %v7971 = vmax.f32 %v7871, 0.0
  %v7972 = vmax.f32 %v7872, 0.0
  %v7973 = vmax.f32 %v7873, 0.0
  %v7974 = vmax.f32 %v7874, 0.0
  %v7975 = vmax.f32 %v7875, 0.0
  %v7976 = vmax.f32 %v7876, 0.0
  %v7977 = vmax.f32 %v7877, 0.0
  %v7978 = vpack.c.bf16 %v7878, %v7878
  %v7979 = vpack.c.bf16 %v7879, %v7879
  %v7980 = vpack.c.bf16 %v7880, %v7880
  %v7981 = vpack.c.bf16 %v7881, %v7881
  %v7982 = vpack.c.bf16 %v7882, %v7882
  %v7983 = vpack.c.bf16 %v7883, %v7883
  %v7984 = vpack.c.bf16 %v7884, %v7884
  %v7985 = vpack.c.bf16 %v7885, %v7885
  %v7986 = vpack.c.bf16 %v7886, %v7886
  %v7987 = vpack.c.bf16 %v7887, %v7887
  %v7988 = vpack.c.bf16 %v7888, %v7888
  %v7989 = vpack.c.bf16 %v7889, %v7889
  %v7990 = vpack.c.bf16 %v7890, %v7890
  %v7991 = vpack.c.bf16 %v7891, %v7891
  %v7992 = vpack.c.bf16 %v7892, %v7892
  %v7993 = vpack.c.bf16 %v7893, %v7893
  %v7994 = vpack.c.bf16 %v7894, %v7894
  %v7995 = vpack.c.bf16 %v7895, %v7895
  %v7996 = vpack.c.bf16 %v7896, %v7896
  %v7997 = vpack.c.bf16 %v7897, %v7897
  %v7998 = vpack.c.bf16 %v7898, %v7898
  %v7999 = vpack.c.bf16 %v7899, %v7899
  %v8000 = vpack.c.bf16 %v7900, %v7900
  %v8001 = vpack.c.bf16 %v7901, %v7901
  %v8002 = vpack.c.bf16 %v7902, %v7902
  %v8003 = vpack.c.bf16 %v7903, %v7903
  %v8004 = vpack.c.bf16 %v7904, %v7904
  %v8005 = vpack.c.bf16 %v7905, %v7905
  %v8006 = vpack.c.bf16 %v7906, %v7906
  %v8007 = vpack.c.bf16 %v7907, %v7907
  %v8008 = vpack.c.bf16 %v7908, %v7908
  %v8009 = vpack.c.bf16 %v7909, %v7909
  %v8010 = vpack.c.bf16 %v7910, %v7910
  %v8011 = vpack.c.bf16 %v7911, %v7911
  %v8012 = vpack.c.bf16 %v7912, %v7912
  %v8013 = vpack.c.bf16 %v7913, %v7913
  %v8014 = vpack.c.bf16 %v7914, %v7914
  %v8015 = vpack.c.bf16 %v7915, %v7915
  %v8016 = vpack.c.bf16 %v7916, %v7916
  %v8017 = vpack.c.bf16 %v7917, %v7917
  %v8018 = vpack.c.bf16 %v7918, %v7918
  %v8019 = vpack.c.bf16 %v7919, %v7919
  %v8020 = vpack.c.bf16 %v7920, %v7920
  %v8021 = vpack.c.bf16 %v7921, %v7921
  %v8022 = vpack.c.bf16 %v7922, %v7922
  %v8023 = vpack.c.bf16 %v7923, %v7923
  %v8024 = vpack.c.bf16 %v7924, %v7924
  %v8025 = vpack.c.bf16 %v7925, %v7925
  %v8026 = vpack.c.bf16 %v7926, %v7926
  %v8027 = vpack.c.bf16 %v7927, %v7927
  %v8028 = vpack.c.bf16 %v7928, %v7928
  %v8029 = vpack.c.bf16 %v7929, %v7929
  %v8030 = vpack.c.bf16 %v7930, %v7930
  %v8031 = vpack.c.bf16 %v7931, %v7931
  %v8032 = vpack.c.bf16 %v7932, %v7932
  %v8033 = vpack.c.bf16 %v7933, %v7933
  %v8034 = vpack.c.bf16 %v7934, %v7934
  %v8035 = vpack.c.bf16 %v7935, %v7935
  %v8036 = vpack.c.bf16 %v7936, %v7936
  %v8037 = vpack.c.bf16 %v7937, %v7937
  %v8038 = vpack.c.bf16 %v7938, %v7938
  %v8039 = vpack.c.bf16 %v7939, %v7939
  %v8040 = vpack.c.bf16 %v7940, %v7940
  %v8041 = vpack.c.bf16 %v7941, %v7941
  %v8042 = vpack.c.bf16 %v7942, %v7942
  %v8043 = vpack.c.bf16 %v7943, %v7943
  %v8044 = vpack.c.bf16 %v7944, %v7944
  %v8045 = vpack.c.bf16 %v7945, %v7945
  %v8046 = vpack.c.bf16 %v7946, %v7946
  %v8047 = vpack.c.bf16 %v7947, %v7947
  %v8048 = vpack.c.bf16 %v7948, %v7948
  %v8049 = vpack.c.bf16 %v7949, %v7949
  %v8050 = vpack.c.bf16 %v7950, %v7950
  %v8051 = vpack.c.bf16 %v7951, %v7951
  %v8052 = vpack.c.bf16 %v7952, %v7952
  %v8053 = vpack.c.bf16 %v7953, %v7953
  %v8054 = vpack.c.bf16 %v7954, %v7954
  %v8055 = vpack.c.bf16 %v7955, %v7955
  %v8056 = vpack.c.bf16 %v7956, %v7956
  %v8057 = vpack.c.bf16 %v7957, %v7957
  %v8058 = vpack.c.bf16 %v7958, %v7958
  %v8059 = vpack.c.bf16 %v7959, %v7959
  %v8060 = vpack.c.bf16 %v7960, %v7960
  %v8061 = vpack.c.bf16 %v7961, %v7961
  %v8062 = vpack.c.bf16 %v7962, %v7962
  %v8063 = vpack.c.bf16 %v7963, %v7963
  %v8064 = vpack.c.bf16 %v7964, %v7964
  %v8065 = vpack.c.bf16 %v7965, %v7965
  %v8066 = vpack.c.bf16 %v7966, %v7966
  %v8067 = vpack.c.bf16 %v7967, %v7967
  %v8068 = vpack.c.bf16 %v7968, %v7968
  %v8069 = vpack.c.bf16 %v7969, %v7969
  %v8070 = vpack.c.bf16 %v7970, %v7970
  %v8071 = vpack.c.bf16 %v7971, %v7971
  %v8072 = vpack.c.bf16 %v7972, %v7972
  %v8073 = vpack.c.bf16 %v7973, %v7973
  %v8074 = vpack.c.bf16 %v7974, %v7974
  %v8075 = vpack.c.bf16 %v7975, %v7975
  %v8076 = vpack.c.bf16 %v7976, %v7976
  %v8077 = vpack.c.bf16 %v7977, %v7977
  %v8078 = vld [vmem:[%s3] sm:$0xf]
  %v8079 = vld [vmem:[%s3 + $0x4] sm:$0xf]
  %v8080 = vld [vmem:[%s3 + $0x8] sm:$0xf]
  %v8081 = vld [vmem:[%s3 + $0xc] sm:$0xf]
  %v8082 = vld [vmem:[%s3 + $0x10] sm:$0xf]
  %v8083 = vld [vmem:[%s3 + $0x14] sm:$0xf]
  %v8084 = vld [vmem:[%s3 + $0x18] sm:$0xf]
  %v8085 = vld [vmem:[%s3 + $0x1c] sm:$0xf]
  %v8086 = vld [vmem:[%s3 + $0x20] sm:$0xf]
  %v8087 = vld [vmem:[%s3 + $0x24] sm:$0xf]
  %v8088 = vld [vmem:[%s3 + $0x28] sm:$0xf]
  %v8089 = vld [vmem:[%s3 + $0x2c] sm:$0xf]
  %v8090 = vld [vmem:[%s3 + $0x30] sm:$0xf]
  %v8091 = vld [vmem:[%s3 + $0x34] sm:$0xf]
  %v8092 = vld [vmem:[%s3 + $0x38] sm:$0xf]
  %v8093 = vld [vmem:[%s3 + $0x3c] sm:$0xf]
  %v8094 = vld [vmem:[%s3 + $0x40] sm:$0xf]
  %v8095 = vld [vmem:[%s3 + $0x44] sm:$0xf]
  %v8096 = vld [vmem:[%s3 + $0x48] sm:$0xf]
  %v8097 = vld [vmem:[%s3 + $0x4c] sm:$0xf]
  %v8098 = vld [vmem:[%s3 + $0x50] sm:$0xf]
  %v8099 = vld [vmem:[%s3 + $0x54] sm:$0xf]
  %v8100 = vld [vmem:[%s3 + $0x58] sm:$0xf]
  %v8101 = vld [vmem:[%s3 + $0x5c] sm:$0xf]
  %v8102 = vld [vmem:[%s3 + $0x60] sm:$0xf]
  %v8103 = vld [vmem:[%s3 + $0x64] sm:$0xf]
  %v8104 = vld [vmem:[%s3 + $0x68] sm:$0xf]
  %v8105 = vld [vmem:[%s3 + $0x6c] sm:$0xf]
  %v8106 = vld [vmem:[%s3 + $0x70] sm:$0xf]
  %v8107 = vld [vmem:[%s3 + $0x74] sm:$0xf]
  %v8108 = vld [vmem:[%s3 + $0x78] sm:$0xf]
  %v8109 = vld [vmem:[%s3 + $0x7c] sm:$0xf]
  %v8110 = vld [vmem:[%s3 + $0x80] sm:$0xf]
  %v8111 = vld [vmem:[%s3 + $0x84] sm:$0xf]
  %v8112 = vld [vmem:[%s3 + $0x88] sm:$0xf]
  %v8113 = vld [vmem:[%s3 + $0x8c] sm:$0xf]
  %v8114 = vld [vmem:[%s3 + $0x90] sm:$0xf]
  %v8115 = vld [vmem:[%s3 + $0x94] sm:$0xf]
  %v8116 = vld [vmem:[%s3 + $0x98] sm:$0xf]
  %v8117 = vld [vmem:[%s3 + $0x9c] sm:$0xf]
  %v8118 = vld [vmem:[%s3 + $0xa0] sm:$0xf]
  %v8119 = vld [vmem:[%s3 + $0xa4] sm:$0xf]
  %v8120 = vld [vmem:[%s3 + $0xa8] sm:$0xf]
  %v8121 = vld [vmem:[%s3 + $0xac] sm:$0xf]
  %v8122 = vld [vmem:[%s3 + $0xb0] sm:$0xf]
  %v8123 = vld [vmem:[%s3 + $0xb4] sm:$0xf]
  %v8124 = vld [vmem:[%s3 + $0xb8] sm:$0xf]
  %v8125 = vld [vmem:[%s3 + $0xbc] sm:$0xf]
  %v8126 = vld [vmem:[%s3 + $0xc0] sm:$0xf]
  %v8127 = vld [vmem:[%s3 + $0xc4] sm:$0xf]
  %v8128 = vld [vmem:[%s3 + $0xc8] sm:$0xf]
  %v8129 = vld [vmem:[%s3 + $0xcc] sm:$0xf]
  %v8130 = vld [vmem:[%s3 + $0xd0] sm:$0xf]
  %v8131 = vld [vmem:[%s3 + $0xd4] sm:$0xf]
  %v8132 = vld [vmem:[%s3 + $0xd8] sm:$0xf]
  %v8133 = vld [vmem:[%s3 + $0xdc] sm:$0xf]
  %v8134 = vld [vmem:[%s3 + $0xe0] sm:$0xf]
  %v8135 = vld [vmem:[%s3 + $0xe4] sm:$0xf]
  %v8136 = vld [vmem:[%s3 + $0xe8] sm:$0xf]
  %v8137 = vld [vmem:[%s3 + $0xec] sm:$0xf]
  %v8138 = vld [vmem:[%s3 + $0xf0] sm:$0xf]
  %v8139 = vld [vmem:[%s3 + $0xf4] sm:$0xf]
  %v8140 = vld [vmem:[%s3 + $0xf8] sm:$0xf]
  %v8141 = vld [vmem:[%s3 + $0xfc] sm:$0xf]
  %v8142 = vld [vmem:[%s3 + $0x100] sm:$0xf]
  %v8143 = vld [vmem:[%s3 + $0x104] sm:$0xf]
  %v8144 = vld [vmem:[%s3 + $0x108] sm:$0xf]
  %v8145 = vld [vmem:[%s3 + $0x10c] sm:$0xf]
  %v8146 = vld [vmem:[%s3 + $0x110] sm:$0xf]
  %v8147 = vld [vmem:[%s3 + $0x114] sm:$0xf]
  %v8148 = vld [vmem:[%s3 + $0x118] sm:$0xf]
  %v8149 = vld [vmem:[%s3 + $0x11c] sm:$0xf]
  %v8150 = vld [vmem:[%s3 + $0x120] sm:$0xf]
  %v8151 = vld [vmem:[%s3 + $0x124] sm:$0xf]
  %v8152 = vld [vmem:[%s3 + $0x128] sm:$0xf]
  %v8153 = vld [vmem:[%s3 + $0x12c] sm:$0xf]
  %v8154 = vld [vmem:[%s3 + $0x130] sm:$0xf]
  %v8155 = vld [vmem:[%s3 + $0x134] sm:$0xf]
  %v8156 = vld [vmem:[%s3 + $0x138] sm:$0xf]
  %v8157 = vld [vmem:[%s3 + $0x13c] sm:$0xf]
  %v8158 = vld [vmem:[%s3 + $0x140] sm:$0xf]
  %v8159 = vld [vmem:[%s3 + $0x144] sm:$0xf]
  %v8160 = vld [vmem:[%s3 + $0x148] sm:$0xf]
  %v8161 = vld [vmem:[%s3 + $0x14c] sm:$0xf]
  %v8162 = vld [vmem:[%s3 + $0x150] sm:$0xf]
  %v8163 = vld [vmem:[%s3 + $0x154] sm:$0xf]
  %v8164 = vld [vmem:[%s3 + $0x158] sm:$0xf]
  %v8165 = vld [vmem:[%s3 + $0x15c] sm:$0xf]
  %v8166 = vld [vmem:[%s3 + $0x160] sm:$0xf]
  %v8167 = vld [vmem:[%s3 + $0x164] sm:$0xf]
  %v8168 = vld [vmem:[%s3 + $0x168] sm:$0xf]
  %v8169 = vld [vmem:[%s3 + $0x16c] sm:$0xf]
  %v8170 = vld [vmem:[%s3 + $0x170] sm:$0xf]
  %v8171 = vld [vmem:[%s3 + $0x174] sm:$0xf]
  %v8172 = vld [vmem:[%s3 + $0x178] sm:$0xf]
  %v8173 = vld [vmem:[%s3 + $0x17c] sm:$0xf]
  %v8174 = vld [vmem:[%s3 + $0x180] sm:$0xf]
  %v8175 = vld [vmem:[%s3 + $0x184] sm:$0xf]
  %v8176 = vld [vmem:[%s3 + $0x188] sm:$0xf]
  %v8177 = vld [vmem:[%s3 + $0x18c] sm:$0xf]
  %v8178 = vld [vmem:[%s3 + $0x190] sm:$0xf]
  %v8179 = vld [vmem:[%s3 + $0x194] sm:$0xf]
  %v8180 = vld [vmem:[%s3 + $0x198] sm:$0xf]
  %v8181 = vld [vmem:[%s3 + $0x19c] sm:$0xf]
  %v8182 = vld [vmem:[%s3 + $0x1a0] sm:$0xf]
  %v8183 = vld [vmem:[%s3 + $0x1a4] sm:$0xf]
  %v8184 = vld [vmem:[%s3 + $0x1a8] sm:$0xf]
  %v8185 = vld [vmem:[%s3 + $0x1ac] sm:$0xf]
  %v8186 = vld [vmem:[%s3 + $0x1b0] sm:$0xf]
  %v8187 = vld [vmem:[%s3 + $0x1b4] sm:$0xf]
  %v8188 = vld [vmem:[%s3 + $0x1b8] sm:$0xf]
  %v8189 = vld [vmem:[%s3 + $0x1bc] sm:$0xf]
  %v8190 = vld [vmem:[%s3 + $0x1c0] sm:$0xf]
  %v8191 = vld [vmem:[%s3 + $0x1c4] sm:$0xf]
  %v8192 = vld [vmem:[%s3 + $0x1c8] sm:$0xf]
  %v8193 = vld [vmem:[%s3 + $0x1cc] sm:$0xf]
  %v8194 = vld [vmem:[%s3 + $0x1d0] sm:$0xf]
  %v8195 = vld [vmem:[%s3 + $0x1d4] sm:$0xf]
  %v8196 = vld [vmem:[%s3 + $0x1d8] sm:$0xf]
  %v8197 = vld [vmem:[%s3 + $0x1dc] sm:$0xf]
  %v8198 = vld [vmem:[%s3 + $0x1e0] sm:$0xf]
  %v8199 = vld [vmem:[%s3 + $0x1e4] sm:$0xf]
  %v8200 = vld [vmem:[%s3 + $0x1e8] sm:$0xf]
  %v8201 = vld [vmem:[%s3 + $0x1ec] sm:$0xf]
  %v8202 = vld [vmem:[%s3 + $0x1f0] sm:$0xf]
  %v8203 = vld [vmem:[%s3 + $0x1f4] sm:$0xf]
  %v8204 = vld [vmem:[%s3 + $0x1f8] sm:$0xf]
  %v8205 = vld [vmem:[%s3 + $0x1fc] sm:$0xf]
  %v8206 = vld [vmem:[%s3 + $0x200] sm:$0xf]
  %v8207 = vld [vmem:[%s3 + $0x204] sm:$0xf]
  %v8208 = vld [vmem:[%s3 + $0x208] sm:$0xf]
  %v8209 = vld [vmem:[%s3 + $0x20c] sm:$0xf]
  %v8210 = vld [vmem:[%s3 + $0x210] sm:$0xf]
  %v8211 = vld [vmem:[%s3 + $0x214] sm:$0xf]
  %v8212 = vld [vmem:[%s3 + $0x218] sm:$0xf]
  %v8213 = vld [vmem:[%s3 + $0x21c] sm:$0xf]
  %v8214 = vld [vmem:[%s3 + $0x220] sm:$0xf]
  %v8215 = vld [vmem:[%s3 + $0x224] sm:$0xf]
  %v8216 = vld [vmem:[%s3 + $0x228] sm:$0xf]
  %v8217 = vld [vmem:[%s3 + $0x22c] sm:$0xf]
  %v8218 = vld [vmem:[%s3 + $0x230] sm:$0xf]
  %v8219 = vld [vmem:[%s3 + $0x234] sm:$0xf]
  %v8220 = vld [vmem:[%s3 + $0x238] sm:$0xf]
  %v8221 = vld [vmem:[%s3 + $0x23c] sm:$0xf]
  %v8222 = vld [vmem:[%s3 + $0x240] sm:$0xf]
  %v8223 = vld [vmem:[%s3 + $0x244] sm:$0xf]
  %v8224 = vld [vmem:[%s3 + $0x248] sm:$0xf]
  %v8225 = vld [vmem:[%s3 + $0x24c] sm:$0xf]
  %v8226 = vld [vmem:[%s3 + $0x250] sm:$0xf]
  %v8227 = vld [vmem:[%s3 + $0x254] sm:$0xf]
  %v8228 = vld [vmem:[%s3 + $0x258] sm:$0xf]
  %v8229 = vld [vmem:[%s3 + $0x25c] sm:$0xf]
  %v8230 = vld [vmem:[%s3 + $0x260] sm:$0xf]
  %v8231 = vld [vmem:[%s3 + $0x264] sm:$0xf]
  %v8232 = vld [vmem:[%s3 + $0x268] sm:$0xf]
  %v8233 = vld [vmem:[%s3 + $0x26c] sm:$0xf]
  %v8234 = vld [vmem:[%s3 + $0x270] sm:$0xf]
  %v8235 = vld [vmem:[%s3 + $0x274] sm:$0xf]
  %v8236 = vld [vmem:[%s3 + $0x278] sm:$0xf]
  %v8237 = vld [vmem:[%s3 + $0x27c] sm:$0xf]
  %v8238 = vld [vmem:[%s3 + $0x280] sm:$0xf]
  %v8239 = vld [vmem:[%s3 + $0x284] sm:$0xf]
  %v8240 = vld [vmem:[%s3 + $0x288] sm:$0xf]
  %v8241 = vld [vmem:[%s3 + $0x28c] sm:$0xf]
  %v8242 = vld [vmem:[%s3 + $0x290] sm:$0xf]
  %v8243 = vld [vmem:[%s3 + $0x294] sm:$0xf]
  %v8244 = vld [vmem:[%s3 + $0x298] sm:$0xf]
  %v8245 = vld [vmem:[%s3 + $0x29c] sm:$0xf]
  %v8246 = vld [vmem:[%s3 + $0x2a0] sm:$0xf]
  %v8247 = vld [vmem:[%s3 + $0x2a4] sm:$0xf]
  %v8248 = vld [vmem:[%s3 + $0x2a8] sm:$0xf]
  %v8249 = vld [vmem:[%s3 + $0x2ac] sm:$0xf]
  %v8250 = vld [vmem:[%s3 + $0x2b0] sm:$0xf]
  %v8251 = vld [vmem:[%s3 + $0x2b4] sm:$0xf]
  %v8252 = vld [vmem:[%s3 + $0x2b8] sm:$0xf]
  %v8253 = vld [vmem:[%s3 + $0x2bc] sm:$0xf]
  %v8254 = vld [vmem:[%s3 + $0x2c0] sm:$0xf]
  %v8255 = vld [vmem:[%s3 + $0x2c4] sm:$0xf]
  %v8256 = vld [vmem:[%s3 + $0x2c8] sm:$0xf]
  %v8257 = vld [vmem:[%s3 + $0x2cc] sm:$0xf]
  %v8258 = vld [vmem:[%s3 + $0x2d0] sm:$0xf]
  %v8259 = vld [vmem:[%s3 + $0x2d4] sm:$0xf]
  %v8260 = vld [vmem:[%s3 + $0x2d8] sm:$0xf]
  %v8261 = vld [vmem:[%s3 + $0x2dc] sm:$0xf]
  %v8262 = vld [vmem:[%s3 + $0x2e0] sm:$0xf]
  %v8263 = vld [vmem:[%s3 + $0x2e4] sm:$0xf]
  %v8264 = vld [vmem:[%s3 + $0x2e8] sm:$0xf]
  %v8265 = vld [vmem:[%s3 + $0x2ec] sm:$0xf]
  %v8266 = vld [vmem:[%s3 + $0x2f0] sm:$0xf]
  %v8267 = vld [vmem:[%s3 + $0x2f4] sm:$0xf]
  %v8268 = vld [vmem:[%s3 + $0x2f8] sm:$0xf]
  %v8269 = vld [vmem:[%s3 + $0x2fc] sm:$0xf]
  %v8270 = vld [vmem:[%s3 + $0x300] sm:$0xf]
  %v8271 = vld [vmem:[%s3 + $0x304] sm:$0xf]
  %v8272 = vld [vmem:[%s3 + $0x308] sm:$0xf]
  %v8273 = vld [vmem:[%s3 + $0x30c] sm:$0xf]
  %v8274 = vld [vmem:[%s3 + $0x310] sm:$0xf]
  %v8275 = vld [vmem:[%s3 + $0x314] sm:$0xf]
  %v8276 = vld [vmem:[%s3 + $0x318] sm:$0xf]
  %v8277 = vld [vmem:[%s3 + $0x31c] sm:$0xf]
  %v8278 = vld [vmem:[%s3 + $0x320] sm:$0xf]
  %v8279 = vld [vmem:[%s3 + $0x324] sm:$0xf]
  %v8280 = vld [vmem:[%s3 + $0x328] sm:$0xf]
  %v8281 = vld [vmem:[%s3 + $0x32c] sm:$0xf]
  %v8282 = vld [vmem:[%s3 + $0x330] sm:$0xf]
  %v8283 = vld [vmem:[%s3 + $0x334] sm:$0xf]
  %v8284 = vld [vmem:[%s3 + $0x338] sm:$0xf]
  %v8285 = vld [vmem:[%s3 + $0x33c] sm:$0xf]
  %v8286 = vld [vmem:[%s3 + $0x340] sm:$0xf]
  %v8287 = vld [vmem:[%s3 + $0x344] sm:$0xf]
  %v8288 = vld [vmem:[%s3 + $0x348] sm:$0xf]
  %v8289 = vld [vmem:[%s3 + $0x34c] sm:$0xf]
  %v8290 = vld [vmem:[%s3 + $0x350] sm:$0xf]
  %v8291 = vld [vmem:[%s3 + $0x354] sm:$0xf]
  %v8292 = vld [vmem:[%s3 + $0x358] sm:$0xf]
  %v8293 = vld [vmem:[%s3 + $0x35c] sm:$0xf]
  %v8294 = vld [vmem:[%s3 + $0x360] sm:$0xf]
  %v8295 = vld [vmem:[%s3 + $0x364] sm:$0xf]
  %v8296 = vld [vmem:[%s3 + $0x368] sm:$0xf]
  %v8297 = vld [vmem:[%s3 + $0x36c] sm:$0xf]
  %v8298 = vld [vmem:[%s3 + $0x370] sm:$0xf]
  %v8299 = vld [vmem:[%s3 + $0x374] sm:$0xf]
  %v8300 = vld [vmem:[%s3 + $0x378] sm:$0xf]
  %v8301 = vld [vmem:[%s3 + $0x37c] sm:$0xf]
  %v8302 = vld [vmem:[%s3 + $0x380] sm:$0xf]
  %v8303 = vld [vmem:[%s3 + $0x384] sm:$0xf]
  %v8304 = vld [vmem:[%s3 + $0x388] sm:$0xf]
  %v8305 = vld [vmem:[%s3 + $0x38c] sm:$0xf]
  %v8306 = vld [vmem:[%s3 + $0x390] sm:$0xf]
  %v8307 = vld [vmem:[%s3 + $0x394] sm:$0xf]
  %v8308 = vld [vmem:[%s3 + $0x398] sm:$0xf]
  %v8309 = vld [vmem:[%s3 + $0x39c] sm:$0xf]
  %v8310 = vld [vmem:[%s3 + $0x3a0] sm:$0xf]
  %v8311 = vld [vmem:[%s3 + $0x3a4] sm:$0xf]
  %v8312 = vld [vmem:[%s3 + $0x3a8] sm:$0xf]
  %v8313 = vld [vmem:[%s3 + $0x3ac] sm:$0xf]
  %v8314 = vld [vmem:[%s3 + $0x3b0] sm:$0xf]
  %v8315 = vld [vmem:[%s3 + $0x3b4] sm:$0xf]
  %v8316 = vld [vmem:[%s3 + $0x3b8] sm:$0xf]
  %v8317 = vld [vmem:[%s3 + $0x3bc] sm:$0xf]
  %v8318 = vld [vmem:[%s3 + $0x3c0] sm:$0xf]
  %v8319 = vld [vmem:[%s3 + $0x3c4] sm:$0xf]
  %v8320 = vld [vmem:[%s3 + $0x3c8] sm:$0xf]
  %v8321 = vld [vmem:[%s3 + $0x3cc] sm:$0xf]
  %v8322 = vld [vmem:[%s3 + $0x3d0] sm:$0xf]
  %v8323 = vld [vmem:[%s3 + $0x3d4] sm:$0xf]
  %v8324 = vld [vmem:[%s3 + $0x3d8] sm:$0xf]
  %v8325 = vld [vmem:[%s3 + $0x3dc] sm:$0xf]
  %v8326 = vld [vmem:[%s3 + $0x3e0] sm:$0xf]
  %v8327 = vld [vmem:[%s3 + $0x3e4] sm:$0xf]
  %v8328 = vld [vmem:[%s3 + $0x3e8] sm:$0xf]
  %v8329 = vld [vmem:[%s3 + $0x3ec] sm:$0xf]
  %v8330 = vld [vmem:[%s3 + $0x3f0] sm:$0xf]
  %v8331 = vld [vmem:[%s3 + $0x3f4] sm:$0xf]
  %v8332 = vld [vmem:[%s3 + $0x3f8] sm:$0xf]
  %v8333 = vld [vmem:[%s3 + $0x3fc] sm:$0xf]
  %v8334 = vld [vmem:[%s3 + $0x400] sm:$0xf]
  %v8335 = vld [vmem:[%s3 + $0x404] sm:$0xf]
  %v8336 = vld [vmem:[%s3 + $0x408] sm:$0xf]
  %v8337 = vld [vmem:[%s3 + $0x40c] sm:$0xf]
  %v8338 = vld [vmem:[%s3 + $0x410] sm:$0xf]
  %v8339 = vld [vmem:[%s3 + $0x414] sm:$0xf]
  %v8340 = vld [vmem:[%s3 + $0x418] sm:$0xf]
  %v8341 = vld [vmem:[%s3 + $0x41c] sm:$0xf]
  %v8342 = vld [vmem:[%s3 + $0x420] sm:$0xf]
  %v8343 = vld [vmem:[%s3 + $0x424] sm:$0xf]
  %v8344 = vld [vmem:[%s3 + $0x428] sm:$0xf]
  %v8345 = vld [vmem:[%s3 + $0x42c] sm:$0xf]
  %v8346 = vld [vmem:[%s3 + $0x430] sm:$0xf]
  %v8347 = vld [vmem:[%s3 + $0x434] sm:$0xf]
  %v8348 = vld [vmem:[%s3 + $0x438] sm:$0xf]
  %v8349 = vld [vmem:[%s3 + $0x43c] sm:$0xf]
  %v8350 = vld [vmem:[%s3 + $0x440] sm:$0xf]
  %v8351 = vld [vmem:[%s3 + $0x444] sm:$0xf]
  %v8352 = vld [vmem:[%s3 + $0x448] sm:$0xf]
  %v8353 = vld [vmem:[%s3 + $0x44c] sm:$0xf]
  %v8354 = vld [vmem:[%s3 + $0x450] sm:$0xf]
  %v8355 = vld [vmem:[%s3 + $0x454] sm:$0xf]
  %v8356 = vld [vmem:[%s3 + $0x458] sm:$0xf]
  %v8357 = vld [vmem:[%s3 + $0x45c] sm:$0xf]
  %v8358 = vld [vmem:[%s3 + $0x460] sm:$0xf]
  %v8359 = vld [vmem:[%s3 + $0x464] sm:$0xf]
  %v8360 = vld [vmem:[%s3 + $0x468] sm:$0xf]
  %v8361 = vld [vmem:[%s3 + $0x46c] sm:$0xf]
  %v8362 = vld [vmem:[%s3 + $0x470] sm:$0xf]
  %v8363 = vld [vmem:[%s3 + $0x474] sm:$0xf]
  %v8364 = vld [vmem:[%s3 + $0x478] sm:$0xf]
  %v8365 = vld [vmem:[%s3 + $0x47c] sm:$0xf]
  %v8366 = vld [vmem:[%s3 + $0x480] sm:$0xf]
  %v8367 = vld [vmem:[%s3 + $0x484] sm:$0xf]
  %v8368 = vld [vmem:[%s3 + $0x488] sm:$0xf]
  %v8369 = vld [vmem:[%s3 + $0x48c] sm:$0xf]
  %v8370 = vld [vmem:[%s3 + $0x490] sm:$0xf]
  %v8371 = vld [vmem:[%s3 + $0x494] sm:$0xf]
  %v8372 = vld [vmem:[%s3 + $0x498] sm:$0xf]
  %v8373 = vld [vmem:[%s3 + $0x49c] sm:$0xf]
  %v8374 = vld [vmem:[%s3 + $0x4a0] sm:$0xf]
  %v8375 = vld [vmem:[%s3 + $0x4a4] sm:$0xf]
  %v8376 = vld [vmem:[%s3 + $0x4a8] sm:$0xf]
  %v8377 = vld [vmem:[%s3 + $0x4ac] sm:$0xf]
  %v8378 = vld [vmem:[%s3 + $0x4b0] sm:$0xf]
  %v8379 = vld [vmem:[%s3 + $0x4b4] sm:$0xf]
  %v8380 = vld [vmem:[%s3 + $0x4b8] sm:$0xf]
  %v8381 = vld [vmem:[%s3 + $0x4bc] sm:$0xf]
  %v8382 = vld [vmem:[%s3 + $0x4c0] sm:$0xf]
  %v8383 = vld [vmem:[%s3 + $0x4c4] sm:$0xf]
  %v8384 = vld [vmem:[%s3 + $0x4c8] sm:$0xf]
  %v8385 = vld [vmem:[%s3 + $0x4cc] sm:$0xf]
  %v8386 = vld [vmem:[%s3 + $0x4d0] sm:$0xf]
  %v8387 = vld [vmem:[%s3 + $0x4d4] sm:$0xf]
  %v8388 = vld [vmem:[%s3 + $0x4d8] sm:$0xf]
  %v8389 = vld [vmem:[%s3 + $0x4dc] sm:$0xf]
  %v8390 = vld [vmem:[%s3 + $0x4e0] sm:$0xf]
  %v8391 = vld [vmem:[%s3 + $0x4e4] sm:$0xf]
  %v8392 = vld [vmem:[%s3 + $0x4e8] sm:$0xf]
  %v8393 = vld [vmem:[%s3 + $0x4ec] sm:$0xf]
  %v8394 = vld [vmem:[%s3 + $0x4f0] sm:$0xf]
  %v8395 = vld [vmem:[%s3 + $0x4f4] sm:$0xf]
  %v8396 = vld [vmem:[%s3 + $0x4f8] sm:$0xf]
  %v8397 = vld [vmem:[%s3 + $0x4fc] sm:$0xf]
  %v8398 = vld [vmem:[%s3 + $0x500] sm:$0xf]
  %v8399 = vld [vmem:[%s3 + $0x504] sm:$0xf]
  %v8400 = vld [vmem:[%s3 + $0x508] sm:$0xf]
  %v8401 = vld [vmem:[%s3 + $0x50c] sm:$0xf]
  %v8402 = vld [vmem:[%s3 + $0x510] sm:$0xf]
  %v8403 = vld [vmem:[%s3 + $0x514] sm:$0xf]
  %v8404 = vld [vmem:[%s3 + $0x518] sm:$0xf]
  %v8405 = vld [vmem:[%s3 + $0x51c] sm:$0xf]
  %v8406 = vld [vmem:[%s3 + $0x520] sm:$0xf]
  %v8407 = vld [vmem:[%s3 + $0x524] sm:$0xf]
  %v8408 = vld [vmem:[%s3 + $0x528] sm:$0xf]
  %v8409 = vld [vmem:[%s3 + $0x52c] sm:$0xf]
  %v8410 = vld [vmem:[%s3 + $0x530] sm:$0xf]
  %v8411 = vld [vmem:[%s3 + $0x534] sm:$0xf]
  %v8412 = vld [vmem:[%s3 + $0x538] sm:$0xf]
  %v8413 = vld [vmem:[%s3 + $0x53c] sm:$0xf]
  %v8414 = vld [vmem:[%s3 + $0x540] sm:$0xf]
  %v8415 = vld [vmem:[%s3 + $0x544] sm:$0xf]
  %v8416 = vld [vmem:[%s3 + $0x548] sm:$0xf]
  %v8417 = vld [vmem:[%s3 + $0x54c] sm:$0xf]
  %v8418 = vld [vmem:[%s3 + $0x550] sm:$0xf]
  %v8419 = vld [vmem:[%s3 + $0x554] sm:$0xf]
  %v8420 = vld [vmem:[%s3 + $0x558] sm:$0xf]
  %v8421 = vld [vmem:[%s3 + $0x55c] sm:$0xf]
  %v8422 = vld [vmem:[%s3 + $0x560] sm:$0xf]
  %v8423 = vld [vmem:[%s3 + $0x564] sm:$0xf]
  %v8424 = vld [vmem:[%s3 + $0x568] sm:$0xf]
  %v8425 = vld [vmem:[%s3 + $0x56c] sm:$0xf]
  %v8426 = vld [vmem:[%s3 + $0x570] sm:$0xf]
  %v8427 = vld [vmem:[%s3 + $0x574] sm:$0xf]
  %v8428 = vld [vmem:[%s3 + $0x578] sm:$0xf]
  %v8429 = vld [vmem:[%s3 + $0x57c] sm:$0xf]
  %v8430 = vld [vmem:[%s3 + $0x580] sm:$0xf]
  %v8431 = vld [vmem:[%s3 + $0x584] sm:$0xf]
  %v8432 = vld [vmem:[%s3 + $0x588] sm:$0xf]
  %v8433 = vld [vmem:[%s3 + $0x58c] sm:$0xf]
  %v8434 = vld [vmem:[%s3 + $0x590] sm:$0xf]
  %v8435 = vld [vmem:[%s3 + $0x594] sm:$0xf]
  %v8436 = vld [vmem:[%s3 + $0x598] sm:$0xf]
  %v8437 = vld [vmem:[%s3 + $0x59c] sm:$0xf]
  %v8438 = vld [vmem:[%s3 + $0x5a0] sm:$0xf]
  %v8439 = vld [vmem:[%s3 + $0x5a4] sm:$0xf]
  %v8440 = vld [vmem:[%s3 + $0x5a8] sm:$0xf]
  %v8441 = vld [vmem:[%s3 + $0x5ac] sm:$0xf]
  %v8442 = vld [vmem:[%s3 + $0x5b0] sm:$0xf]
  %v8443 = vld [vmem:[%s3 + $0x5b4] sm:$0xf]
  %v8444 = vld [vmem:[%s3 + $0x5b8] sm:$0xf]
  %v8445 = vld [vmem:[%s3 + $0x5bc] sm:$0xf]
  %v8446 = vld [vmem:[%s3 + $0x5c0] sm:$0xf]
  %v8447 = vld [vmem:[%s3 + $0x5c4] sm:$0xf]
  %v8448 = vld [vmem:[%s3 + $0x5c8] sm:$0xf]
  %v8449 = vld [vmem:[%s3 + $0x5cc] sm:$0xf]
  %v8450 = vld [vmem:[%s3 + $0x5d0] sm:$0xf]
  %v8451 = vld [vmem:[%s3 + $0x5d4] sm:$0xf]
  %v8452 = vld [vmem:[%s3 + $0x5d8] sm:$0xf]
  %v8453 = vld [vmem:[%s3 + $0x5dc] sm:$0xf]
  %v8454 = vld [vmem:[%s3 + $0x5e0] sm:$0xf]
  %v8455 = vld [vmem:[%s3 + $0x5e4] sm:$0xf]
  %v8456 = vld [vmem:[%s3 + $0x5e8] sm:$0xf]
  %v8457 = vld [vmem:[%s3 + $0x5ec] sm:$0xf]
  %v8458 = vld [vmem:[%s3 + $0x5f0] sm:$0xf]
  %v8459 = vld [vmem:[%s3 + $0x5f4] sm:$0xf]
  %v8460 = vld [vmem:[%s3 + $0x5f8] sm:$0xf]
  %v8461 = vld [vmem:[%s3 + $0x5fc] sm:$0xf]
  %v8462 = vld [vmem:[%s3 + $0x600] sm:$0xf]
  %v8463 = vld [vmem:[%s3 + $0x604] sm:$0xf]
  %v8464 = vld [vmem:[%s3 + $0x608] sm:$0xf]
  %v8465 = vld [vmem:[%s3 + $0x60c] sm:$0xf]
  %v8466 = vld [vmem:[%s3 + $0x610] sm:$0xf]
  %v8467 = vld [vmem:[%s3 + $0x614] sm:$0xf]
  %v8468 = vld [vmem:[%s3 + $0x618] sm:$0xf]
  %v8469 = vld [vmem:[%s3 + $0x61c] sm:$0xf]
  %v8470 = vld [vmem:[%s3 + $0x620] sm:$0xf]
  %v8471 = vld [vmem:[%s3 + $0x624] sm:$0xf]
  %v8472 = vld [vmem:[%s3 + $0x628] sm:$0xf]
  %v8473 = vld [vmem:[%s3 + $0x62c] sm:$0xf]
  %v8474 = vld [vmem:[%s3 + $0x630] sm:$0xf]
  %v8475 = vld [vmem:[%s3 + $0x634] sm:$0xf]
  %v8476 = vld [vmem:[%s3 + $0x638] sm:$0xf]
  %v8477 = vld [vmem:[%s3 + $0x63c] sm:$0xf]
  %v8478 = vld [vmem:[%s3 + $0x640] sm:$0xf]
  %v8479 = vld [vmem:[%s3 + $0x644] sm:$0xf]
  %v8480 = vld [vmem:[%s3 + $0x648] sm:$0xf]
  %v8481 = vld [vmem:[%s3 + $0x64c] sm:$0xf]
  %v8482 = vld [vmem:[%s3 + $0x650] sm:$0xf]
  %v8483 = vld [vmem:[%s3 + $0x654] sm:$0xf]
  %v8484 = vld [vmem:[%s3 + $0x658] sm:$0xf]
  %v8485 = vld [vmem:[%s3 + $0x65c] sm:$0xf]
  %v8486 = vld [vmem:[%s3 + $0x660] sm:$0xf]
  %v8487 = vld [vmem:[%s3 + $0x664] sm:$0xf]
  %v8488 = vld [vmem:[%s3 + $0x668] sm:$0xf]
  %v8489 = vld [vmem:[%s3 + $0x66c] sm:$0xf]
  %v8490 = vld [vmem:[%s3 + $0x670] sm:$0xf]
  %v8491 = vld [vmem:[%s3 + $0x674] sm:$0xf]
  %v8492 = vld [vmem:[%s3 + $0x678] sm:$0xf]
  %v8493 = vld [vmem:[%s3 + $0x67c] sm:$0xf]
  %v8494 = vld [vmem:[%s3 + $0x680] sm:$0xf]
  %v8495 = vld [vmem:[%s3 + $0x684] sm:$0xf]
  %v8496 = vld [vmem:[%s3 + $0x688] sm:$0xf]
  %v8497 = vld [vmem:[%s3 + $0x68c] sm:$0xf]
  %v8498 = vld [vmem:[%s3 + $0x690] sm:$0xf]
  %v8499 = vld [vmem:[%s3 + $0x694] sm:$0xf]
  %v8500 = vld [vmem:[%s3 + $0x698] sm:$0xf]
  %v8501 = vld [vmem:[%s3 + $0x69c] sm:$0xf]
  %v8502 = vld [vmem:[%s3 + $0x6a0] sm:$0xf]
  %v8503 = vld [vmem:[%s3 + $0x6a4] sm:$0xf]
  %v8504 = vld [vmem:[%s3 + $0x6a8] sm:$0xf]
  %v8505 = vld [vmem:[%s3 + $0x6ac] sm:$0xf]
  %v8506 = vld [vmem:[%s3 + $0x6b0] sm:$0xf]
  %v8507 = vld [vmem:[%s3 + $0x6b4] sm:$0xf]
  %v8508 = vld [vmem:[%s3 + $0x6b8] sm:$0xf]
  %v8509 = vld [vmem:[%s3 + $0x6bc] sm:$0xf]
  %v8510 = vld [vmem:[%s3 + $0x6c0] sm:$0xf]
  %v8511 = vld [vmem:[%s3 + $0x6c4] sm:$0xf]
  %v8512 = vld [vmem:[%s3 + $0x6c8] sm:$0xf]
  %v8513 = vld [vmem:[%s3 + $0x6cc] sm:$0xf]
  %v8514 = vld [vmem:[%s3 + $0x6d0] sm:$0xf]
  %v8515 = vld [vmem:[%s3 + $0x6d4] sm:$0xf]
  %v8516 = vld [vmem:[%s3 + $0x6d8] sm:$0xf]
  %v8517 = vld [vmem:[%s3 + $0x6dc] sm:$0xf]
  %v8518 = vld [vmem:[%s3 + $0x6e0] sm:$0xf]
  %v8519 = vld [vmem:[%s3 + $0x6e4] sm:$0xf]
  %v8520 = vld [vmem:[%s3 + $0x6e8] sm:$0xf]
  %v8521 = vld [vmem:[%s3 + $0x6ec] sm:$0xf]
  %v8522 = vld [vmem:[%s3 + $0x6f0] sm:$0xf]
  %v8523 = vld [vmem:[%s3 + $0x6f4] sm:$0xf]
  %v8524 = vld [vmem:[%s3 + $0x6f8] sm:$0xf]
  %v8525 = vld [vmem:[%s3 + $0x6fc] sm:$0xf]
  %v8526 = vld [vmem:[%s3 + $0x700] sm:$0xf]
  %v8527 = vld [vmem:[%s3 + $0x704] sm:$0xf]
  %v8528 = vld [vmem:[%s3 + $0x708] sm:$0xf]
  %v8529 = vld [vmem:[%s3 + $0x70c] sm:$0xf]
  %v8530 = vld [vmem:[%s3 + $0x710] sm:$0xf]
  %v8531 = vld [vmem:[%s3 + $0x714] sm:$0xf]
  %v8532 = vld [vmem:[%s3 + $0x718] sm:$0xf]
  %v8533 = vld [vmem:[%s3 + $0x71c] sm:$0xf]
  %v8534 = vld [vmem:[%s3 + $0x720] sm:$0xf]
  %v8535 = vld [vmem:[%s3 + $0x724] sm:$0xf]
  %v8536 = vld [vmem:[%s3 + $0x728] sm:$0xf]
  %v8537 = vld [vmem:[%s3 + $0x72c] sm:$0xf]
  %v8538 = vld [vmem:[%s3 + $0x730] sm:$0xf]
  %v8539 = vld [vmem:[%s3 + $0x734] sm:$0xf]
  %v8540 = vld [vmem:[%s3 + $0x738] sm:$0xf]
  %v8541 = vld [vmem:[%s3 + $0x73c] sm:$0xf]
  %v8542 = vld [vmem:[%s3 + $0x740] sm:$0xf]
  %v8543 = vld [vmem:[%s3 + $0x744] sm:$0xf]
  %v8544 = vld [vmem:[%s3 + $0x748] sm:$0xf]
  %v8545 = vld [vmem:[%s3 + $0x74c] sm:$0xf]
  %v8546 = vld [vmem:[%s3 + $0x750] sm:$0xf]
  %v8547 = vld [vmem:[%s3 + $0x754] sm:$0xf]
  %v8548 = vld [vmem:[%s3 + $0x758] sm:$0xf]
  %v8549 = vld [vmem:[%s3 + $0x75c] sm:$0xf]
  %v8550 = vld [vmem:[%s3 + $0x760] sm:$0xf]
  %v8551 = vld [vmem:[%s3 + $0x764] sm:$0xf]
  %v8552 = vld [vmem:[%s3 + $0x768] sm:$0xf]
  %v8553 = vld [vmem:[%s3 + $0x76c] sm:$0xf]
  %v8554 = vld [vmem:[%s3 + $0x770] sm:$0xf]
  %v8555 = vld [vmem:[%s3 + $0x774] sm:$0xf]
  %v8556 = vld [vmem:[%s3 + $0x778] sm:$0xf]
  %v8557 = vld [vmem:[%s3 + $0x77c] sm:$0xf]
  %v8558 = vld [vmem:[%s3 + $0x780] sm:$0xf]
  %v8559 = vld [vmem:[%s3 + $0x784] sm:$0xf]
  %v8560 = vld [vmem:[%s3 + $0x788] sm:$0xf]
  %v8561 = vld [vmem:[%s3 + $0x78c] sm:$0xf]
  %v8562 = vld [vmem:[%s3 + $0x790] sm:$0xf]
  %v8563 = vld [vmem:[%s3 + $0x794] sm:$0xf]
  %v8564 = vld [vmem:[%s3 + $0x798] sm:$0xf]
  %v8565 = vld [vmem:[%s3 + $0x79c] sm:$0xf]
  %v8566 = vld [vmem:[%s3 + $0x7a0] sm:$0xf]
  %v8567 = vld [vmem:[%s3 + $0x7a4] sm:$0xf]
  %v8568 = vld [vmem:[%s3 + $0x7a8] sm:$0xf]
  %v8569 = vld [vmem:[%s3 + $0x7ac] sm:$0xf]
  %v8570 = vld [vmem:[%s3 + $0x7b0] sm:$0xf]
  %v8571 = vld [vmem:[%s3 + $0x7b4] sm:$0xf]
  %v8572 = vld [vmem:[%s3 + $0x7b8] sm:$0xf]
  %v8573 = vld [vmem:[%s3 + $0x7bc] sm:$0xf]
  %v8574 = vld [vmem:[%s3 + $0x7c0] sm:$0xf]
  %v8575 = vld [vmem:[%s3 + $0x7c4] sm:$0xf]
  %v8576 = vld [vmem:[%s3 + $0x7c8] sm:$0xf]
  %v8577 = vld [vmem:[%s3 + $0x7cc] sm:$0xf]
  %v8578 = vld [vmem:[%s3 + $0x7d0] sm:$0xf]
  %v8579 = vld [vmem:[%s3 + $0x7d4] sm:$0xf]
  %v8580 = vld [vmem:[%s3 + $0x7d8] sm:$0xf]
  %v8581 = vld [vmem:[%s3 + $0x7dc] sm:$0xf]
  %v8582 = vld [vmem:[%s3 + $0x7e0] sm:$0xf]
  %v8583 = vld [vmem:[%s3 + $0x7e4] sm:$0xf]
  %v8584 = vld [vmem:[%s3 + $0x7e8] sm:$0xf]
  %v8585 = vld [vmem:[%s3 + $0x7ec] sm:$0xf]
  %v8586 = vld [vmem:[%s3 + $0x7f0] sm:$0xf]
  %v8587 = vld [vmem:[%s3 + $0x7f4] sm:$0xf]
  %v8588 = vld [vmem:[%s3 + $0x7f8] sm:$0xf]
  %v8589 = vld [vmem:[%s3 + $0x7fc] sm:$0xf]
  %v8590 = vld [vmem:[%s3 + $0x800] sm:$0xf]
  %v8591 = vld [vmem:[%s3 + $0x804] sm:$0xf]
  %v8592 = vld [vmem:[%s3 + $0x808] sm:$0xf]
  %v8593 = vld [vmem:[%s3 + $0x80c] sm:$0xf]
  %v8594 = vld [vmem:[%s3 + $0x810] sm:$0xf]
  %v8595 = vld [vmem:[%s3 + $0x814] sm:$0xf]
  %v8596 = vld [vmem:[%s3 + $0x818] sm:$0xf]
  %v8597 = vld [vmem:[%s3 + $0x81c] sm:$0xf]
  %v8598 = vld [vmem:[%s3 + $0x820] sm:$0xf]
  %v8599 = vld [vmem:[%s3 + $0x824] sm:$0xf]
  %v8600 = vld [vmem:[%s3 + $0x828] sm:$0xf]
  %v8601 = vld [vmem:[%s3 + $0x82c] sm:$0xf]
  %v8602 = vld [vmem:[%s3 + $0x830] sm:$0xf]
  %v8603 = vld [vmem:[%s3 + $0x834] sm:$0xf]
  %v8604 = vld [vmem:[%s3 + $0x838] sm:$0xf]
  %v8605 = vld [vmem:[%s3 + $0x83c] sm:$0xf]
  %v8606 = vld [vmem:[%s3 + $0x840] sm:$0xf]
  %v8607 = vld [vmem:[%s3 + $0x844] sm:$0xf]
  %v8608 = vld [vmem:[%s3 + $0x848] sm:$0xf]
  %v8609 = vld [vmem:[%s3 + $0x84c] sm:$0xf]
  %v8610 = vld [vmem:[%s3 + $0x850] sm:$0xf]
  %v8611 = vld [vmem:[%s3 + $0x854] sm:$0xf]
  %v8612 = vld [vmem:[%s3 + $0x858] sm:$0xf]
  %v8613 = vld [vmem:[%s3 + $0x85c] sm:$0xf]
  %v8614 = vld [vmem:[%s3 + $0x860] sm:$0xf]
  %v8615 = vld [vmem:[%s3 + $0x864] sm:$0xf]
  %v8616 = vld [vmem:[%s3 + $0x868] sm:$0xf]
  %v8617 = vld [vmem:[%s3 + $0x86c] sm:$0xf]
  %v8618 = vld [vmem:[%s3 + $0x870] sm:$0xf]
  %v8619 = vld [vmem:[%s3 + $0x874] sm:$0xf]
  %v8620 = vld [vmem:[%s3 + $0x878] sm:$0xf]
  %v8621 = vld [vmem:[%s3 + $0x87c] sm:$0xf]
  %v8622 = vld [vmem:[%s3 + $0x880] sm:$0xf]
  %v8623 = vld [vmem:[%s3 + $0x884] sm:$0xf]
  %v8624 = vld [vmem:[%s3 + $0x888] sm:$0xf]
  %v8625 = vld [vmem:[%s3 + $0x88c] sm:$0xf]
  %v8626 = vld [vmem:[%s3 + $0x890] sm:$0xf]
  %v8627 = vld [vmem:[%s3 + $0x894] sm:$0xf]
  %v8628 = vld [vmem:[%s3 + $0x898] sm:$0xf]
  %v8629 = vld [vmem:[%s3 + $0x89c] sm:$0xf]
  %v8630 = vld [vmem:[%s3 + $0x8a0] sm:$0xf]
  %v8631 = vld [vmem:[%s3 + $0x8a4] sm:$0xf]
  %v8632 = vld [vmem:[%s3 + $0x8a8] sm:$0xf]
  %v8633 = vld [vmem:[%s3 + $0x8ac] sm:$0xf]
  %v8634 = vld [vmem:[%s3 + $0x8b0] sm:$0xf]
  %v8635 = vld [vmem:[%s3 + $0x8b4] sm:$0xf]
  %v8636 = vld [vmem:[%s3 + $0x8b8] sm:$0xf]
  %v8637 = vld [vmem:[%s3 + $0x8bc] sm:$0xf]
  %v8638 = vld [vmem:[%s3 + $0x8c0] sm:$0xf]
  %v8639 = vld [vmem:[%s3 + $0x8c4] sm:$0xf]
  %v8640 = vld [vmem:[%s3 + $0x8c8] sm:$0xf]
  %v8641 = vld [vmem:[%s3 + $0x8cc] sm:$0xf]
  %v8642 = vld [vmem:[%s3 + $0x8d0] sm:$0xf]
  %v8643 = vld [vmem:[%s3 + $0x8d4] sm:$0xf]
  %v8644 = vld [vmem:[%s3 + $0x8d8] sm:$0xf]
  %v8645 = vld [vmem:[%s3 + $0x8dc] sm:$0xf]
  %v8646 = vld [vmem:[%s3 + $0x8e0] sm:$0xf]
  %v8647 = vld [vmem:[%s3 + $0x8e4] sm:$0xf]
  %v8648 = vld [vmem:[%s3 + $0x8e8] sm:$0xf]
  %v8649 = vld [vmem:[%s3 + $0x8ec] sm:$0xf]
  %v8650 = vld [vmem:[%s3 + $0x8f0] sm:$0xf]
  %v8651 = vld [vmem:[%s3 + $0x8f4] sm:$0xf]
  %v8652 = vld [vmem:[%s3 + $0x8f8] sm:$0xf]
  %v8653 = vld [vmem:[%s3 + $0x8fc] sm:$0xf]
  %v8654 = vld [vmem:[%s3 + $0x900] sm:$0xf]
  %v8655 = vld [vmem:[%s3 + $0x904] sm:$0xf]
  %v8656 = vld [vmem:[%s3 + $0x908] sm:$0xf]
  %v8657 = vld [vmem:[%s3 + $0x90c] sm:$0xf]
  %v8658 = vld [vmem:[%s3 + $0x910] sm:$0xf]
  %v8659 = vld [vmem:[%s3 + $0x914] sm:$0xf]
  %v8660 = vld [vmem:[%s3 + $0x918] sm:$0xf]
  %v8661 = vld [vmem:[%s3 + $0x91c] sm:$0xf]
  %v8662 = vld [vmem:[%s3 + $0x920] sm:$0xf]
  %v8663 = vld [vmem:[%s3 + $0x924] sm:$0xf]
  %v8664 = vld [vmem:[%s3 + $0x928] sm:$0xf]
  %v8665 = vld [vmem:[%s3 + $0x92c] sm:$0xf]
  %v8666 = vld [vmem:[%s3 + $0x930] sm:$0xf]
  %v8667 = vld [vmem:[%s3 + $0x934] sm:$0xf]
  %v8668 = vld [vmem:[%s3 + $0x938] sm:$0xf]
  %v8669 = vld [vmem:[%s3 + $0x93c] sm:$0xf]
  %v8670 = vld [vmem:[%s3 + $0x940] sm:$0xf]
  %v8671 = vld [vmem:[%s3 + $0x944] sm:$0xf]
  %v8672 = vld [vmem:[%s3 + $0x948] sm:$0xf]
  %v8673 = vld [vmem:[%s3 + $0x94c] sm:$0xf]
  %v8674 = vld [vmem:[%s3 + $0x950] sm:$0xf]
  %v8675 = vld [vmem:[%s3 + $0x954] sm:$0xf]
  %v8676 = vld [vmem:[%s3 + $0x958] sm:$0xf]
  %v8677 = vld [vmem:[%s3 + $0x95c] sm:$0xf]
  %v8678 = vld [vmem:[%s3 + $0x960] sm:$0xf]
  %v8679 = vld [vmem:[%s3 + $0x964] sm:$0xf]
  %v8680 = vld [vmem:[%s3 + $0x968] sm:$0xf]
  %v8681 = vld [vmem:[%s3 + $0x96c] sm:$0xf]
  %v8682 = vld [vmem:[%s3 + $0x970] sm:$0xf]
  %v8683 = vld [vmem:[%s3 + $0x974] sm:$0xf]
  %v8684 = vld [vmem:[%s3 + $0x978] sm:$0xf]
  %v8685 = vld [vmem:[%s3 + $0x97c] sm:$0xf]
  %v8686 = vld [vmem:[%s3 + $0x980] sm:$0xf]
  %v8687 = vld [vmem:[%s3 + $0x984] sm:$0xf]
  %v8688 = vld [vmem:[%s3 + $0x988] sm:$0xf]
  %v8689 = vld [vmem:[%s3 + $0x98c] sm:$0xf]
  %v8690 = vld [vmem:[%s3 + $0x990] sm:$0xf]
  %v8691 = vld [vmem:[%s3 + $0x994] sm:$0xf]
  %v8692 = vld [vmem:[%s3 + $0x998] sm:$0xf]
  %v8693 = vld [vmem:[%s3 + $0x99c] sm:$0xf]
  %v8694 = vld [vmem:[%s3 + $0x9a0] sm:$0xf]
  %v8695 = vld [vmem:[%s3 + $0x9a4] sm:$0xf]
  %v8696 = vld [vmem:[%s3 + $0x9a8] sm:$0xf]
  %v8697 = vld [vmem:[%s3 + $0x9ac] sm:$0xf]
  %v8698 = vld [vmem:[%s3 + $0x9b0] sm:$0xf]
  %v8699 = vld [vmem:[%s3 + $0x9b4] sm:$0xf]
  %v8700 = vld [vmem:[%s3 + $0x9b8] sm:$0xf]
  %v8701 = vld [vmem:[%s3 + $0x9bc] sm:$0xf]
  %v8702 = vld [vmem:[%s3 + $0x9c0] sm:$0xf]
  %v8703 = vld [vmem:[%s3 + $0x9c4] sm:$0xf]
  %v8704 = vld [vmem:[%s3 + $0x9c8] sm:$0xf]
  %v8705 = vld [vmem:[%s3 + $0x9cc] sm:$0xf]
  %v8706 = vld [vmem:[%s3 + $0x9d0] sm:$0xf]
  %v8707 = vld [vmem:[%s3 + $0x9d4] sm:$0xf]
  %v8708 = vld [vmem:[%s3 + $0x9d8] sm:$0xf]
  %v8709 = vld [vmem:[%s3 + $0x9dc] sm:$0xf]
  %v8710 = vld [vmem:[%s3 + $0x9e0] sm:$0xf]
  %v8711 = vld [vmem:[%s3 + $0x9e4] sm:$0xf]
  %v8712 = vld [vmem:[%s3 + $0x9e8] sm:$0xf]
  %v8713 = vld [vmem:[%s3 + $0x9ec] sm:$0xf]
  %v8714 = vld [vmem:[%s3 + $0x9f0] sm:$0xf]
  %v8715 = vld [vmem:[%s3 + $0x9f4] sm:$0xf]
  %v8716 = vld [vmem:[%s3 + $0x9f8] sm:$0xf]
  %v8717 = vld [vmem:[%s3 + $0x9fc] sm:$0xf]
  %v8718 = vld [vmem:[%s3 + $0xa00] sm:$0xf]
  %v8719 = vld [vmem:[%s3 + $0xa04] sm:$0xf]
  %v8720 = vld [vmem:[%s3 + $0xa08] sm:$0xf]
  %v8721 = vld [vmem:[%s3 + $0xa0c] sm:$0xf]
  %v8722 = vld [vmem:[%s3 + $0xa10] sm:$0xf]
  %v8723 = vld [vmem:[%s3 + $0xa14] sm:$0xf]
  %v8724 = vld [vmem:[%s3 + $0xa18] sm:$0xf]
  %v8725 = vld [vmem:[%s3 + $0xa1c] sm:$0xf]
  %v8726 = vld [vmem:[%s3 + $0xa20] sm:$0xf]
  %v8727 = vld [vmem:[%s3 + $0xa24] sm:$0xf]
  %v8728 = vld [vmem:[%s3 + $0xa28] sm:$0xf]
  %v8729 = vld [vmem:[%s3 + $0xa2c] sm:$0xf]
  %v8730 = vld [vmem:[%s3 + $0xa30] sm:$0xf]
  %v8731 = vld [vmem:[%s3 + $0xa34] sm:$0xf]
  %v8732 = vld [vmem:[%s3 + $0xa38] sm:$0xf]
  %v8733 = vld [vmem:[%s3 + $0xa3c] sm:$0xf]
  %v8734 = vld [vmem:[%s3 + $0xa40] sm:$0xf]
  %v8735 = vld [vmem:[%s3 + $0xa44] sm:$0xf]
  %v8736 = vld [vmem:[%s3 + $0xa48] sm:$0xf]
  %v8737 = vld [vmem:[%s3 + $0xa4c] sm:$0xf]
  %v8738 = vld [vmem:[%s3 + $0xa50] sm:$0xf]
  %v8739 = vld [vmem:[%s3 + $0xa54] sm:$0xf]
  %v8740 = vld [vmem:[%s3 + $0xa58] sm:$0xf]
  %v8741 = vld [vmem:[%s3 + $0xa5c] sm:$0xf]
  %v8742 = vld [vmem:[%s3 + $0xa60] sm:$0xf]
  %v8743 = vld [vmem:[%s3 + $0xa64] sm:$0xf]
  %v8744 = vld [vmem:[%s3 + $0xa68] sm:$0xf]
  %v8745 = vld [vmem:[%s3 + $0xa6c] sm:$0xf]
  %v8746 = vld [vmem:[%s3 + $0xa70] sm:$0xf]
  %v8747 = vld [vmem:[%s3 + $0xa74] sm:$0xf]
  %v8748 = vld [vmem:[%s3 + $0xa78] sm:$0xf]
  %v8749 = vld [vmem:[%s3 + $0xa7c] sm:$0xf]
  %v8750 = vld [vmem:[%s3 + $0xa80] sm:$0xf]
  %v8751 = vld [vmem:[%s3 + $0xa84] sm:$0xf]
  %v8752 = vld [vmem:[%s3 + $0xa88] sm:$0xf]
  %v8753 = vld [vmem:[%s3 + $0xa8c] sm:$0xf]
  %v8754 = vld [vmem:[%s3 + $0xa90] sm:$0xf]
  %v8755 = vld [vmem:[%s3 + $0xa94] sm:$0xf]
  %v8756 = vld [vmem:[%s3 + $0xa98] sm:$0xf]
  %v8757 = vld [vmem:[%s3 + $0xa9c] sm:$0xf]
  %v8758 = vld [vmem:[%s3 + $0xaa0] sm:$0xf]
  %v8759 = vld [vmem:[%s3 + $0xaa4] sm:$0xf]
  %v8760 = vld [vmem:[%s3 + $0xaa8] sm:$0xf]
  %v8761 = vld [vmem:[%s3 + $0xaac] sm:$0xf]
  %v8762 = vld [vmem:[%s3 + $0xab0] sm:$0xf]
  %v8763 = vld [vmem:[%s3 + $0xab4] sm:$0xf]
  %v8764 = vld [vmem:[%s3 + $0xab8] sm:$0xf]
  %v8765 = vld [vmem:[%s3 + $0xabc] sm:$0xf]
  %v8766 = vld [vmem:[%s3 + $0xac0] sm:$0xf]
  %v8767 = vld [vmem:[%s3 + $0xac4] sm:$0xf]
  %v8768 = vld [vmem:[%s3 + $0xac8] sm:$0xf]
  %v8769 = vld [vmem:[%s3 + $0xacc] sm:$0xf]
  %v8770 = vld [vmem:[%s3 + $0xad0] sm:$0xf]
  %v8771 = vld [vmem:[%s3 + $0xad4] sm:$0xf]
  %v8772 = vld [vmem:[%s3 + $0xad8] sm:$0xf]
  %v8773 = vld [vmem:[%s3 + $0xadc] sm:$0xf]
  %v8774 = vld [vmem:[%s3 + $0xae0] sm:$0xf]
  %v8775 = vld [vmem:[%s3 + $0xae4] sm:$0xf]
  %v8776 = vld [vmem:[%s3 + $0xae8] sm:$0xf]
  %v8777 = vld [vmem:[%s3 + $0xaec] sm:$0xf]
  %v8778 = vld [vmem:[%s3 + $0xaf0] sm:$0xf]
  %v8779 = vld [vmem:[%s3 + $0xaf4] sm:$0xf]
  %v8780 = vld [vmem:[%s3 + $0xaf8] sm:$0xf]
  %v8781 = vld [vmem:[%s3 + $0xafc] sm:$0xf]
  %v8782 = vld [vmem:[%s3 + $0xb00] sm:$0xf]
  %v8783 = vld [vmem:[%s3 + $0xb04] sm:$0xf]
  %v8784 = vld [vmem:[%s3 + $0xb08] sm:$0xf]
  %v8785 = vld [vmem:[%s3 + $0xb0c] sm:$0xf]
  %v8786 = vld [vmem:[%s3 + $0xb10] sm:$0xf]
  %v8787 = vld [vmem:[%s3 + $0xb14] sm:$0xf]
  %v8788 = vld [vmem:[%s3 + $0xb18] sm:$0xf]
  %v8789 = vld [vmem:[%s3 + $0xb1c] sm:$0xf]
  %v8790 = vld [vmem:[%s3 + $0xb20] sm:$0xf]
  %v8791 = vld [vmem:[%s3 + $0xb24] sm:$0xf]
  %v8792 = vld [vmem:[%s3 + $0xb28] sm:$0xf]
  %v8793 = vld [vmem:[%s3 + $0xb2c] sm:$0xf]
  %v8794 = vld [vmem:[%s3 + $0xb30] sm:$0xf]
  %v8795 = vld [vmem:[%s3 + $0xb34] sm:$0xf]
  %v8796 = vld [vmem:[%s3 + $0xb38] sm:$0xf]
  %v8797 = vld [vmem:[%s3 + $0xb3c] sm:$0xf]
  %v8798 = vld [vmem:[%s3 + $0xb40] sm:$0xf]
  %v8799 = vld [vmem:[%s3 + $0xb44] sm:$0xf]
  %v8800 = vld [vmem:[%s3 + $0xb48] sm:$0xf]
  %v8801 = vld [vmem:[%s3 + $0xb4c] sm:$0xf]
  %v8802 = vld [vmem:[%s3 + $0xb50] sm:$0xf]
  %v8803 = vld [vmem:[%s3 + $0xb54] sm:$0xf]
  %v8804 = vld [vmem:[%s3 + $0xb58] sm:$0xf]
  %v8805 = vld [vmem:[%s3 + $0xb5c] sm:$0xf]
  %v8806 = vld [vmem:[%s3 + $0xb60] sm:$0xf]
  %v8807 = vld [vmem:[%s3 + $0xb64] sm:$0xf]
  %v8808 = vld [vmem:[%s3 + $0xb68] sm:$0xf]
  %v8809 = vld [vmem:[%s3 + $0xb6c] sm:$0xf]
  %v8810 = vld [vmem:[%s3 + $0xb70] sm:$0xf]
  %v8811 = vld [vmem:[%s3 + $0xb74] sm:$0xf]
  %v8812 = vld [vmem:[%s3 + $0xb78] sm:$0xf]
  %v8813 = vld [vmem:[%s3 + $0xb7c] sm:$0xf]
  %v8814 = vld [vmem:[%s3 + $0xb80] sm:$0xf]
  %v8815 = vld [vmem:[%s3 + $0xb84] sm:$0xf]
  %v8816 = vld [vmem:[%s3 + $0xb88] sm:$0xf]
  %v8817 = vld [vmem:[%s3 + $0xb8c] sm:$0xf]
  %v8818 = vld [vmem:[%s3 + $0xb90] sm:$0xf]
  %v8819 = vld [vmem:[%s3 + $0xb94] sm:$0xf]
  %v8820 = vld [vmem:[%s3 + $0xb98] sm:$0xf]
  %v8821 = vld [vmem:[%s3 + $0xb9c] sm:$0xf]
  %v8822 = vld [vmem:[%s3 + $0xba0] sm:$0xf]
  %v8823 = vld [vmem:[%s3 + $0xba4] sm:$0xf]
  %v8824 = vld [vmem:[%s3 + $0xba8] sm:$0xf]
  %v8825 = vld [vmem:[%s3 + $0xbac] sm:$0xf]
  %v8826 = vld [vmem:[%s3 + $0xbb0] sm:$0xf]
  %v8827 = vld [vmem:[%s3 + $0xbb4] sm:$0xf]
  %v8828 = vld [vmem:[%s3 + $0xbb8] sm:$0xf]
  %v8829 = vld [vmem:[%s3 + $0xbbc] sm:$0xf]
  %v8830 = vld [vmem:[%s3 + $0xbc0] sm:$0xf]
  %v8831 = vld [vmem:[%s3 + $0xbc4] sm:$0xf]
  %v8832 = vld [vmem:[%s3 + $0xbc8] sm:$0xf]
  %v8833 = vld [vmem:[%s3 + $0xbcc] sm:$0xf]
  %v8834 = vld [vmem:[%s3 + $0xbd0] sm:$0xf]
  %v8835 = vld [vmem:[%s3 + $0xbd4] sm:$0xf]
  %v8836 = vld [vmem:[%s3 + $0xbd8] sm:$0xf]
  %v8837 = vld [vmem:[%s3 + $0xbdc] sm:$0xf]
  %v8838 = vld [vmem:[%s3 + $0xbe0] sm:$0xf]
  %v8839 = vld [vmem:[%s3 + $0xbe4] sm:$0xf]
  %v8840 = vld [vmem:[%s3 + $0xbe8] sm:$0xf]
  %v8841 = vld [vmem:[%s3 + $0xbec] sm:$0xf]
  %v8842 = vld [vmem:[%s3 + $0xbf0] sm:$0xf]
  %v8843 = vld [vmem:[%s3 + $0xbf4] sm:$0xf]
  %v8844 = vld [vmem:[%s3 + $0xbf8] sm:$0xf]
  %v8845 = vld [vmem:[%s3 + $0xbfc] sm:$0xf]
  %v8846 = vld [vmem:[%s3 + $0xc00] sm:$0xf]
  %v8847 = vld [vmem:[%s3 + $0xc04] sm:$0xf]
  %v8848 = vld [vmem:[%s3 + $0xc08] sm:$0xf]
  %v8849 = vld [vmem:[%s3 + $0xc0c] sm:$0xf]
  %v8850 = vld [vmem:[%s3 + $0xc10] sm:$0xf]
  %v8851 = vld [vmem:[%s3 + $0xc14] sm:$0xf]
  %v8852 = vld [vmem:[%s3 + $0xc18] sm:$0xf]
  %v8853 = vld [vmem:[%s3 + $0xc1c] sm:$0xf]
  %v8854 = vld [vmem:[%s3 + $0xc20] sm:$0xf]
  %v8855 = vld [vmem:[%s3 + $0xc24] sm:$0xf]
  %v8856 = vld [vmem:[%s3 + $0xc28] sm:$0xf]
  %v8857 = vld [vmem:[%s3 + $0xc2c] sm:$0xf]
  %v8858 = vld [vmem:[%s3 + $0xc30] sm:$0xf]
  %v8859 = vld [vmem:[%s3 + $0xc34] sm:$0xf]
  %v8860 = vld [vmem:[%s3 + $0xc38] sm:$0xf]
  %v8861 = vld [vmem:[%s3 + $0xc3c] sm:$0xf]
  %v8862 = vld [vmem:[%s3 + $0xc40] sm:$0xf]
  %v8863 = vld [vmem:[%s3 + $0xc44] sm:$0xf]
  %v8864 = vld [vmem:[%s3 + $0xc48] sm:$0xf]
  %v8865 = vld [vmem:[%s3 + $0xc4c] sm:$0xf]
  %v8866 = vld [vmem:[%s3 + $0xc50] sm:$0xf]
  %v8867 = vld [vmem:[%s3 + $0xc54] sm:$0xf]
  %v8868 = vld [vmem:[%s3 + $0xc58] sm:$0xf]
  %v8869 = vld [vmem:[%s3 + $0xc5c] sm:$0xf]
  %v8870 = vld [vmem:[%s3 + $0xc60] sm:$0xf]
  %v8871 = vld [vmem:[%s3 + $0xc64] sm:$0xf]
  %v8872 = vld [vmem:[%s3 + $0xc68] sm:$0xf]
  %v8873 = vld [vmem:[%s3 + $0xc6c] sm:$0xf]
  %v8874 = vld [vmem:[%s3 + $0xc70] sm:$0xf]
  %v8875 = vld [vmem:[%s3 + $0xc74] sm:$0xf]
  %v8876 = vld [vmem:[%s3 + $0xc78] sm:$0xf]
  %v8877 = vld [vmem:[%s3 + $0xc7c] sm:$0xf]
  %v8886 = vunpack.c.l.b16 %v8078
  %v8887 = vunpack.c.l.b16 %v8079
  %v8888 = vunpack.c.l.b16 %v8080
  %v8889 = vunpack.c.l.b16 %v8081
  %v8890 = vunpack.c.l.b16 %v8082
  %v8891 = vunpack.c.l.b16 %v8083
  %v8892 = vunpack.c.l.b16 %v8084
  %v8893 = vunpack.c.l.b16 %v8085
  %v8894 = vpack.c.b16 %v8887, %v8886
  %v8895 = vpack.c.b16 %v8889, %v8888
  %v8896 = vpack.c.b16 %v8891, %v8890
  %v8897 = vpack.c.b16 %v8893, %v8892
  %vm8902 = vcmask 523264
  %v8904 = vsel %vm8902, %v7978, 0
  %8906 = vmatprep.subr.bf16.mxu0 0
  %8907 = vmatpush1.bf16.msra.mxu0 %v8894
  %8908 = vmatprep.subr.bf16.mxu0 0
  %8909 = vmatpush1.bf16.msra.mxu0 %v8895
  %8910 = vmatprep.subr.bf16.mxu0 0
  %8911 = vmatpush1.bf16.msra.mxu0 %v8896
  %8912 = vmatprep.subr.bf16.mxu0 0
  %8913 = vmatpush1.bf16.msra.mxu0 %v8897
  %8914 = vmatprep.subr.bf16.mxu0 0
  %8915 = vmatpush1.bf16.msra.mxu0 0
  %8916 = vmatprep.subr.bf16.mxu0 0
  %8917 = vmatpush1.bf16.msra.mxu0 0
  %8918 = vmatprep.subr.bf16.mxu0 0
  %8919 = vmatpush1.bf16.msra.mxu0 0
  %8920 = vmatprep.subr.bf16.mxu0 0
  %8921 = vmatpush1.bf16.msra.mxu0 0
  %8922 = vmatprep.subr.bf16.mxu0 0
  %8923 = vmatpush1.bf16.msra.mxu0 0
  %8924 = vmatprep.subr.bf16.mxu0 0
  %8925 = vmatpush1.bf16.msra.mxu0 0
  %8926 = vmatprep.subr.bf16.mxu0 0
  %8927 = vmatpush1.bf16.msra.mxu0 0
  %8928 = vmatprep.subr.bf16.mxu0 0
  %8929 = vmatpush1.bf16.msra.mxu0 0
  %8930 = vmatprep.subr.bf16.mxu0 0
  %8931 = vmatpush1.bf16.msra.mxu0 0
  %8932 = vmatprep.subr.bf16.mxu0 0
  %8933 = vmatpush1.bf16.msra.mxu0 0
  %8934 = vmatprep.subr.bf16.mxu0 0
  %8935 = vmatpush1.bf16.msra.mxu0 0
  %8936 = vmatprep.subr.bf16.mxu0 0
  %8937 = vmatpush1.bf16.msra.mxu0 0
  %8938 = vmatprep.mubr.bf16.mxu0 0
  %8939 = vmatmul.mubr.bf16.gmra.mrb[0].mxu0 %v8904
  %v8940 = vpop.f32.mrb[0].mxu0
  %v8941 = vadd.f32 0.0, %v8940
  %v8942 = vpop.f32.mrb[0].mxu0
  %v8943 = vpop.f32.mrb[0].mxu0
  %v8944 = vpop.f32.mrb[0].mxu0
  %8945 = vdwg.mxu0
  %v8954 = vunpack.c.l.b16 %v8086
  %v8955 = vunpack.c.l.b16 %v8087
  %v8956 = vunpack.c.l.b16 %v8088
  %v8957 = vunpack.c.l.b16 %v8089
  %v8958 = vunpack.c.l.b16 %v8090
  %v8959 = vunpack.c.l.b16 %v8091
  %v8960 = vunpack.c.l.b16 %v8092
  %v8961 = vunpack.c.l.b16 %v8093
  %v8962 = vpack.c.b16 %v8955, %v8954
  %v8963 = vpack.c.b16 %v8957, %v8956
  %v8964 = vpack.c.b16 %v8959, %v8958
  %v8965 = vpack.c.b16 %v8961, %v8960
  %v8971 = vsel %vm8902, %v7979, 0
  %8973 = vmatprep.subr.bf16.mxu0 0
  %8974 = vmatpush1.bf16.msra.mxu0 %v8962
  %8975 = vmatprep.subr.bf16.mxu0 0
  %8976 = vmatpush1.bf16.msra.mxu0 %v8963
  %8977 = vmatprep.subr.bf16.mxu0 0
  %8978 = vmatpush1.bf16.msra.mxu0 %v8964
  %8979 = vmatprep.subr.bf16.mxu0 0
  %8980 = vmatpush1.bf16.msra.mxu0 %v8965
  %8981 = vmatprep.subr.bf16.mxu0 0
  %8982 = vmatpush1.bf16.msra.mxu0 0
  %8983 = vmatprep.subr.bf16.mxu0 0
  %8984 = vmatpush1.bf16.msra.mxu0 0
  %8985 = vmatprep.subr.bf16.mxu0 0
  %8986 = vmatpush1.bf16.msra.mxu0 0
  %8987 = vmatprep.subr.bf16.mxu0 0
  %8988 = vmatpush1.bf16.msra.mxu0 0
  %8989 = vmatprep.subr.bf16.mxu0 0
  %8990 = vmatpush1.bf16.msra.mxu0 0
  %8991 = vmatprep.subr.bf16.mxu0 0
  %8992 = vmatpush1.bf16.msra.mxu0 0
  %8993 = vmatprep.subr.bf16.mxu0 0
  %8994 = vmatpush1.bf16.msra.mxu0 0
  %8995 = vmatprep.subr.bf16.mxu0 0
  %8996 = vmatpush1.bf16.msra.mxu0 0
  %8997 = vmatprep.subr.bf16.mxu0 0
  %8998 = vmatpush1.bf16.msra.mxu0 0
  %8999 = vmatprep.subr.bf16.mxu0 0
  %9000 = vmatpush1.bf16.msra.mxu0 0
  %9001 = vmatprep.subr.bf16.mxu0 0
  %9002 = vmatpush1.bf16.msra.mxu0 0
  %9003 = vmatprep.subr.bf16.mxu0 0
  %9004 = vmatpush1.bf16.msra.mxu0 0
  %9005 = vmatprep.mubr.bf16.mxu0 0
  %9006 = vmatmul.mubr.bf16.gmra.mrb[0].mxu0 %v8971
  %v9007 = vpop.f32.mrb[0].mxu0
  %v9008 = vadd.f32 0.0, %v9007
  %v9009 = vpop.f32.mrb[0].mxu0
  %v9010 = vpop.f32.mrb[0].mxu0
  %v9011 = vpop.f32.mrb[0].mxu0
  %9012 = vdwg.mxu0
  %v9021 = vunpack.c.l.b16 %v8094
  %v9022 = vunpack.c.l.b16 %v8095
  %v9023 = vunpack.c.l.b16 %v8096
  %v9024 = vunpack.c.l.b16 %v8097
  %v9025 = vunpack.c.l.b16 %v8098
  %v9026 = vunpack.c.l.b16 %v8099
  %v9027 = vunpack.c.l.b16 %v8100
  %v9028 = vunpack.c.l.b16 %v8101
  %v9029 = vpack.c.b16 %v9022, %v9021
  %v9030 = vpack.c.b16 %v9024, %v9023
  %v9031 = vpack.c.b16 %v9026, %v9025
  %v9032 = vpack.c.b16 %v9028, %v9027
  %v9038 = vsel %vm8902, %v7980, 0
  %9040 = vmatprep.subr.bf16.mxu0 0
  %9041 = vmatpush1.bf16.msra.mxu0 %v9029
  %9042 = vmatprep.subr.bf16.mxu0 0
  %9043 = vmatpush1.bf16.msra.mxu0 %v9030
  %9044 = vmatprep.subr.bf16.mxu0 0
  %9045 = vmatpush1.bf16.msra.mxu0 %v9031
  %9046 = vmatprep.subr.bf16.mxu0 0
  %9047 = vmatpush1.bf16.msra.mxu0 %v9032
  %9048 = vmatprep.subr.bf16.mxu0 0
  %9049 = vmatpush1.bf16.msra.mxu0 0
  %9050 = vmatprep.subr.bf16.mxu0 0
  %9051 = vmatpush1.bf16.msra.mxu0 0
  %9052 = vmatprep.subr.bf16.mxu0 0
  %9053 = vmatpush1.bf16.msra.mxu0 0
  %9054 = vmatprep.subr.bf16.mxu0 0
  %9055 = vmatpush1.bf16.msra.mxu0 0
  %9056 = vmatprep.subr.bf16.mxu0 0
  %9057 = vmatpush1.bf16.msra.mxu0 0
  %9058 = vmatprep.subr.bf16.mxu0 0
  %9059 = vmatpush1.bf16.msra.mxu0 0
  %9060 = vmatprep.subr.bf16.mxu0 0
  %9061 = vmatpush1.bf16.msra.mxu0 0
  %9062 = vmatprep.subr.bf16.mxu0 0
  %9063 = vmatpush1.bf16.msra.mxu0 0
  %9064 = vmatprep.subr.bf16.mxu0 0
  %9065 = vmatpush1.bf16.msra.mxu0 0
  %9066 = vmatprep.subr.bf16.mxu0 0
  %9067 = vmatpush1.bf16.msra.mxu0 0
  %9068 = vmatprep.subr.bf16.mxu0 0
  %9069 = vmatpush1.bf16.msra.mxu0 0
  %9070 = vmatprep.subr.bf16.mxu0 0
  %9071 = vmatpush1.bf16.msra.mxu0 0
  %9072 = vmatprep.mubr.bf16.mxu0 0
  %9073 = vmatmul.mubr.bf16.gmra.mrb[0].mxu0 %v9038
  %v9074 = vpop.f32.mrb[0].mxu0
  %v9075 = vadd.f32 0.0, %v9074
  %v9076 = vpop.f32.mrb[0].mxu0
  %v9077 = vpop.f32.mrb[0].mxu0
  %v9078 = vpop.f32.mrb[0].mxu0
  %9079 = vdwg.mxu0
  %v9088 = vunpack.c.l.b16 %v8102
  %v9089 = vunpack.c.l.b16 %v8103
  %v9090 = vunpack.c.l.b16 %v8104
  %v9091 = vunpack.c.l.b16 %v8105
  %v9092 = vunpack.c.l.b16 %v8106
  %v9093 = vunpack.c.l.b16 %v8107
  %v9094 = vunpack.c.l.b16 %v8108
  %v9095 = vunpack.c.l.b16 %v8109
  %v9096 = vpack.c.b16 %v9089, %v9088
  %v9097 = vpack.c.b16 %v9091, %v9090
  %v9098 = vpack.c.b16 %v9093, %v9092
  %v9099 = vpack.c.b16 %v9095, %v9094
  %v9105 = vsel %vm8902, %v7981, 0
  %9107 = vmatprep.subr.bf16.mxu0 0
  %9108 = vmatpush1.bf16.msra.mxu0 %v9096
  %9109 = vmatprep.subr.bf16.mxu0 0
  %9110 = vmatpush1.bf16.msra.mxu0 %v9097
  %9111 = vmatprep.subr.bf16.mxu0 0
  %9112 = vmatpush1.bf16.msra.mxu0 %v9098
  %9113 = vmatprep.subr.bf16.mxu0 0
  %9114 = vmatpush1.bf16.msra.mxu0 %v9099
  %9115 = vmatprep.subr.bf16.mxu0 0
  %9116 = vmatpush1.bf16.msra.mxu0 0
  %9117 = vmatprep.subr.bf16.mxu0 0
  %9118 = vmatpush1.bf16.msra.mxu0 0
  %9119 = vmatprep.subr.bf16.mxu0 0
  %9120 = vmatpush1.bf16.msra.mxu0 0
  %9121 = vmatprep.subr.bf16.mxu0 0
  %9122 = vmatpush1.bf16.msra.mxu0 0
  %9123 = vmatprep.subr.bf16.mxu0 0
  %9124 = vmatpush1.bf16.msra.mxu0 0
  %9125 = vmatprep.subr.bf16.mxu0 0
  %9126 = vmatpush1.bf16.msra.mxu0 0
  %9127 = vmatprep.subr.bf16.mxu0 0
  %9128 = vmatpush1.bf16.msra.mxu0 0
  %9129 = vmatprep.subr.bf16.mxu0 0
  %9130 = vmatpush1.bf16.msra.mxu0 0
  %9131 = vmatprep.subr.bf16.mxu0 0
  %9132 = vmatpush1.bf16.msra.mxu0 0
  %9133 = vmatprep.subr.bf16.mxu0 0
  %9134 = vmatpush1.bf16.msra.mxu0 0
  %9135 = vmatprep.subr.bf16.mxu0 0
  %9136 = vmatpush1.bf16.msra.mxu0 0
  %9137 = vmatprep.subr.bf16.mxu0 0
  %9138 = vmatpush1.bf16.msra.mxu0 0
  %9139 = vmatprep.mubr.bf16.mxu0 0
  %9140 = vmatmul.mubr.bf16.gmra.mrb[0].mxu0 %v9105
  %v9141 = vpop.f32.mrb[0].mxu0
  %v9142 = vadd.f32 0.0, %v9141
  %v9143 = vpop.f32.mrb[0].mxu0
  %v9144 = vpop.f32.mrb[0].mxu0
  %v9145 = vpop.f32.mrb[0].mxu0
  %9146 = vdwg.mxu0
  %v9155 = vunpack.c.l.b16 %v8110
  %v9156 = vunpack.c.l.b16 %v8111
  %v9157 = vunpack.c.l.b16 %v8112
  %v9158 = vunpack.c.l.b16 %v8113
  %v9159 = vunpack.c.l.b16 %v8114
  %v9160 = vunpack.c.l.b16 %v8115
  %v9161 = vunpack.c.l.b16 %v8116
  %v9162 = vunpack.c.l.b16 %v8117
  %v9163 = vpack.c.b16 %v9156, %v9155
  %v9164 = vpack.c.b16 %v9158, %v9157
  %v9165 = vpack.c.b16 %v9160, %v9159
  %v9166 = vpack.c.b16 %v9162, %v9161
  %v9172 = vsel %vm8902, %v7982, 0
  %9174 = vmatprep.subr.bf16.mxu0 0
  %9175 = vmatpush1.bf16.msra.mxu0 %v9163
  %9176 = vmatprep.subr.bf16.mxu0 0
  %9177 = vmatpush1.bf16.msra.mxu0 %v9164
  %9178 = vmatprep.subr.bf16.mxu0 0
  %9179 = vmatpush1.bf16.msra.mxu0 %v9165
  %9180 = vmatprep.subr.bf16.mxu0 0
  %9181 = vmatpush1.bf16.msra.mxu0 %v9166
  %9182 = vmatprep.subr.bf16.mxu0 0
  %9183 = vmatpush1.bf16.msra.mxu0 0
  %9184 = vmatprep.subr.bf16.mxu0 0
  %9185 = vmatpush1.bf16.msra.mxu0 0
  %9186 = vmatprep.subr.bf16.mxu0 0
  %9187 = vmatpush1.bf16.msra.mxu0 0
  %9188 = vmatprep.subr.bf16.mxu0 0
  %9189 = vmatpush1.bf16.msra.mxu0 0
  %9190 = vmatprep.subr.bf16.mxu0 0
  %9191 = vmatpush1.bf16.msra.mxu0 0
  %9192 = vmatprep.subr.bf16.mxu0 0
  %9193 = vmatpush1.bf16.msra.mxu0 0
  %9194 = vmatprep.subr.bf16.mxu0 0
  %9195 = vmatpush1.bf16.msra.mxu0 0
  %9196 = vmatprep.subr.bf16.mxu0 0
  %9197 = vmatpush1.bf16.msra.mxu0 0
  %9198 = vmatprep.subr.bf16.mxu0 0
  %9199 = vmatpush1.bf16.msra.mxu0 0
  %9200 = vmatprep.subr.bf16.mxu0 0
  %9201 = vmatpush1.bf16.msra.mxu0 0
  %9202 = vmatprep.subr.bf16.mxu0 0
  %9203 = vmatpush1.bf16.msra.mxu0 0
  %9204 = vmatprep.subr.bf16.mxu0 0
  %9205 = vmatpush1.bf16.msra.mxu0 0
  %9206 = vmatprep.mubr.bf16.mxu0 0
  %9207 = vmatmul.mubr.bf16.gmra.mrb[0].mxu0 %v9172
  %v9208 = vpop.f32.mrb[0].mxu0
  %v9209 = vadd.f32 0.0, %v9208
  %v9210 = vpop.f32.mrb[0].mxu0
  %v9211 = vpop.f32.mrb[0].mxu0
  %v9212 = vpop.f32.mrb[0].mxu0
  %9213 = vdwg.mxu0
  %v9222 = vunpack.c.l.b16 %v8118
  %v9223 = vunpack.c.l.b16 %v8119
  %v9224 = vunpack.c.l.b16 %v8120
  %v9225 = vunpack.c.l.b16 %v8121
  %v9226 = vunpack.c.l.b16 %v8122
  %v9227 = vunpack.c.l.b16 %v8123
  %v9228 = vunpack.c.l.b16 %v8124
  %v9229 = vunpack.c.l.b16 %v8125
  %v9230 = vpack.c.b16 %v9223, %v9222
  %v9231 = vpack.c.b16 %v9225, %v9224
  %v9232 = vpack.c.b16 %v9227, %v9226
  %v9233 = vpack.c.b16 %v9229, %v9228
  %v9239 = vsel %vm8902, %v7983, 0
  %9241 = vmatprep.subr.bf16.mxu0 0
  %9242 = vmatpush1.bf16.msra.mxu0 %v9230
  %9243 = vmatprep.subr.bf16.mxu0 0
  %9244 = vmatpush1.bf16.msra.mxu0 %v9231
  %9245 = vmatprep.subr.bf16.mxu0 0
  %9246 = vmatpush1.bf16.msra.mxu0 %v9232
  %9247 = vmatprep.subr.bf16.mxu0 0
  %9248 = vmatpush1.bf16.msra.mxu0 %v9233
  %9249 = vmatprep.subr.bf16.mxu0 0
  %9250 = vmatpush1.bf16.msra.mxu0 0
  %9251 = vmatprep.subr.bf16.mxu0 0
  %9252 = vmatpush1.bf16.msra.mxu0 0
  %9253 = vmatprep.subr.bf16.mxu0 0
  %9254 = vmatpush1.bf16.msra.mxu0 0
  %9255 = vmatprep.subr.bf16.mxu0 0
  %9256 = vmatpush1.bf16.msra.mxu0 0
  %9257 = vmatprep.subr.bf16.mxu0 0
  %9258 = vmatpush1.bf16.msra.mxu0 0
  %9259 = vmatprep.subr.bf16.mxu0 0
  %9260 = vmatpush1.bf16.msra.mxu0 0
  %9261 = vmatprep.subr.bf16.mxu0 0
  %9262 = vmatpush1.bf16.msra.mxu0 0
  %9263 = vmatprep.subr.bf16.mxu0 0
  %9264 = vmatpush1.bf16.msra.mxu0 0
  %9265 = vmatprep.subr.bf16.mxu0 0
  %9266 = vmatpush1.bf16.msra.mxu0 0
  %9267 = vmatprep.subr.bf16.mxu0 0
  %9268 = vmatpush1.bf16.msra.mxu0 0
  %9269 = vmatprep.subr.bf16.mxu0 0
  %9270 = vmatpush1.bf16.msra.mxu0 0
  %9271 = vmatprep.subr.bf16.mxu0 0
  %9272 = vmatpush1.bf16.msra.mxu0 0
  %9273 = vmatprep.mubr.bf16.mxu0 0
  %9274 = vmatmul.mubr.bf16.gmra.mrb[0].mxu0 %v9239
  %v9275 = vpop.f32.mrb[0].mxu0
  %v9276 = vadd.f32 0.0, %v9275
  %v9277 = vpop.f32.mrb[0].mxu0
  %v9278 = vpop.f32.mrb[0].mxu0
  %v9279 = vpop.f32.mrb[0].mxu0
  %9280 = vdwg.mxu0
  %v9289 = vunpack.c.l.b16 %v8126
  %v9290 = vunpack.c.l.b16 %v8127
  %v9291 = vunpack.c.l.b16 %v8128
  %v9292 = vunpack.c.l.b16 %v8129
  %v9293 = vunpack.c.l.b16 %v8130
  %v9294 = vunpack.c.l.b16 %v8131
  %v9295 = vunpack.c.l.b16 %v8132
  %v9296 = vunpack.c.l.b16 %v8133
  %v9297 = vpack.c.b16 %v9290, %v9289
  %v9298 = vpack.c.b16 %v9292, %v9291
  %v9299 = vpack.c.b16 %v9294, %v9293
  %v9300 = vpack.c.b16 %v9296, %v9295
  %v9306 = vsel %vm8902, %v7984, 0
  %9308 = vmatprep.subr.bf16.mxu0 0
  %9309 = vmatpush1.bf16.msra.mxu0 %v9297
  %9310 = vmatprep.subr.bf16.mxu0 0
  %9311 = vmatpush1.bf16.msra.mxu0 %v9298
  %9312 = vmatprep.subr.bf16.mxu0 0
  %9313 = vmatpush1.bf16.msra.mxu0 %v9299
  %9314 = vmatprep.subr.bf16.mxu0 0
  %9315 = vmatpush1.bf16.msra.mxu0 %v9300
  %9316 = vmatprep.subr.bf16.mxu0 0
  %9317 = vmatpush1.bf16.msra.mxu0 0
  %9318 = vmatprep.subr.bf16.mxu0 0
  %9319 = vmatpush1.bf16.msra.mxu0 0
  %9320 = vmatprep.subr.bf16.mxu0 0
  %9321 = vmatpush1.bf16.msra.mxu0 0
  %9322 = vmatprep.subr.bf16.mxu0 0
  %9323 = vmatpush1.bf16.msra.mxu0 0
  %9324 = vmatprep.subr.bf16.mxu0 0
  %9325 = vmatpush1.bf16.msra.mxu0 0
  %9326 = vmatprep.subr.bf16.mxu0 0
  %9327 = vmatpush1.bf16.msra.mxu0 0
  %9328 = vmatprep.subr.bf16.mxu0 0
  %9329 = vmatpush1.bf16.msra.mxu0 0
  %9330 = vmatprep.subr.bf16.mxu0 0
  %9331 = vmatpush1.bf16.msra.mxu0 0
  %9332 = vmatprep.subr.bf16.mxu0 0
  %9333 = vmatpush1.bf16.msra.mxu0 0
  %9334 = vmatprep.subr.bf16.mxu0 0
  %9335 = vmatpush1.bf16.msra.mxu0 0
  %9336 = vmatprep.subr.bf16.mxu0 0
  %9337 = vmatpush1.bf16.msra.mxu0 0
  %9338 = vmatprep.subr.bf16.mxu0 0
  %9339 = vmatpush1.bf16.msra.mxu0 0
  %9340 = vmatprep.mubr.bf16.mxu0 0
  %9341 = vmatmul.mubr.bf16.gmra.mrb[0].mxu0 %v9306
  %v9342 = vpop.f32.mrb[0].mxu0
  %v9343 = vadd.f32 0.0, %v9342
  %v9344 = vpop.f32.mrb[0].mxu0
  %v9345 = vpop.f32.mrb[0].mxu0
  %v9346 = vpop.f32.mrb[0].mxu0
  %9347 = vdwg.mxu0
  %v9356 = vunpack.c.l.b16 %v8134
  %v9357 = vunpack.c.l.b16 %v8135
  %v9358 = vunpack.c.l.b16 %v8136
  %v9359 = vunpack.c.l.b16 %v8137
  %v9360 = vunpack.c.l.b16 %v8138
  %v9361 = vunpack.c.l.b16 %v8139
  %v9362 = vunpack.c.l.b16 %v8140
  %v9363 = vunpack.c.l.b16 %v8141
  %v9364 = vpack.c.b16 %v9357, %v9356
  %v9365 = vpack.c.b16 %v9359, %v9358
  %v9366 = vpack.c.b16 %v9361, %v9360
  %v9367 = vpack.c.b16 %v9363, %v9362
  %v9373 = vsel %vm8902, %v7985, 0
  %9375 = vmatprep.subr.bf16.mxu0 0
  %9376 = vmatpush1.bf16.msra.mxu0 %v9364
  %9377 = vmatprep.subr.bf16.mxu0 0
  %9378 = vmatpush1.bf16.msra.mxu0 %v9365
  %9379 = vmatprep.subr.bf16.mxu0 0
  %9380 = vmatpush1.bf16.msra.mxu0 %v9366
  %9381 = vmatprep.subr.bf16.mxu0 0
  %9382 = vmatpush1.bf16.msra.mxu0 %v9367
  %9383 = vmatprep.subr.bf16.mxu0 0
  %9384 = vmatpush1.bf16.msra.mxu0 0
  %9385 = vmatprep.subr.bf16.mxu0 0
  %9386 = vmatpush1.bf16.msra.mxu0 0
  %9387 = vmatprep.subr.bf16.mxu0 0
  %9388 = vmatpush1.bf16.msra.mxu0 0
  %9389 = vmatprep.subr.bf16.mxu0 0
  %9390 = vmatpush1.bf16.msra.mxu0 0
  %9391 = vmatprep.subr.bf16.mxu0 0
  %9392 = vmatpush1.bf16.msra.mxu0 0
  %9393 = vmatprep.subr.bf16.mxu0 0
  %9394 = vmatpush1.bf16.msra.mxu0 0
  %9395 = vmatprep.subr.bf16.mxu0 0
  %9396 = vmatpush1.bf16.msra.mxu0 0
  %9397 = vmatprep.subr.bf16.mxu0 0
  %9398 = vmatpush1.bf16.msra.mxu0 0
  %9399 = vmatprep.subr.bf16.mxu0 0
  %9400 = vmatpush1.bf16.msra.mxu0 0
  %9401 = vmatprep.subr.bf16.mxu0 0
  %9402 = vmatpush1.bf16.msra.mxu0 0
  %9403 = vmatprep.subr.bf16.mxu0 0
  %9404 = vmatpush1.bf16.msra.mxu0 0
  %9405 = vmatprep.subr.bf16.mxu0 0
  %9406 = vmatpush1.bf16.msra.mxu0 0
  %9407 = vmatprep.mubr.bf16.mxu0 0
  %9408 = vmatmul.mubr.bf16.gmra.mrb[0].mxu0 %v9373
  %v9409 = vpop.f32.mrb[0].mxu0
  %v9410 = vadd.f32 0.0, %v9409
  %v9411 = vpop.f32.mrb[0].mxu0
  %v9412 = vpop.f32.mrb[0].mxu0
  %v9413 = vpop.f32.mrb[0].mxu0
  %9414 = vdwg.mxu0
  %v9423 = vunpack.c.l.b16 %v8142
  %v9424 = vunpack.c.l.b16 %v8143
  %v9425 = vunpack.c.l.b16 %v8144
  %v9426 = vunpack.c.l.b16 %v8145
  %v9427 = vunpack.c.l.b16 %v8146
  %v9428 = vunpack.c.l.b16 %v8147
  %v9429 = vunpack.c.l.b16 %v8148
  %v9430 = vunpack.c.l.b16 %v8149
  %v9431 = vpack.c.b16 %v9424, %v9423
  %v9432 = vpack.c.b16 %v9426, %v9425
  %v9433 = vpack.c.b16 %v9428, %v9427
  %v9434 = vpack.c.b16 %v9430, %v9429
  %v9440 = vsel %vm8902, %v7986, 0
  %9442 = vmatprep.subr.bf16.mxu0 0
  %9443 = vmatpush1.bf16.msra.mxu0 %v9431
  %9444 = vmatprep.subr.bf16.mxu0 0
  %9445 = vmatpush1.bf16.msra.mxu0 %v9432
  %9446 = vmatprep.subr.bf16.mxu0 0
  %9447 = vmatpush1.bf16.msra.mxu0 %v9433
  %9448 = vmatprep.subr.bf16.mxu0 0
  %9449 = vmatpush1.bf16.msra.mxu0 %v9434
  %9450 = vmatprep.subr.bf16.mxu0 0
  %9451 = vmatpush1.bf16.msra.mxu0 0
  %9452 = vmatprep.subr.bf16.mxu0 0
  %9453 = vmatpush1.bf16.msra.mxu0 0
  %9454 = vmatprep.subr.bf16.mxu0 0
  %9455 = vmatpush1.bf16.msra.mxu0 0
  %9456 = vmatprep.subr.bf16.mxu0 0
  %9457 = vmatpush1.bf16.msra.mxu0 0
  %9458 = vmatprep.subr.bf16.mxu0 0
  %9459 = vmatpush1.bf16.msra.mxu0 0
  %9460 = vmatprep.subr.bf16.mxu0 0
  %9461 = vmatpush1.bf16.msra.mxu0 0
  %9462 = vmatprep.subr.bf16.mxu0 0
  %9463 = vmatpush1.bf16.msra.mxu0 0
  %9464 = vmatprep.subr.bf16.mxu0 0
  %9465 = vmatpush1.bf16.msra.mxu0 0
  %9466 = vmatprep.subr.bf16.mxu0 0
  %9467 = vmatpush1.bf16.msra.mxu0 0
  %9468 = vmatprep.subr.bf16.mxu0 0
  %9469 = vmatpush1.bf16.msra.mxu0 0
  %9470 = vmatprep.subr.bf16.mxu0 0
  %9471 = vmatpush1.bf16.msra.mxu0 0
  %9472 = vmatprep.subr.bf16.mxu0 0
  %9473 = vmatpush1.bf16.msra.mxu0 0
  %9474 = vmatprep.mubr.bf16.mxu0 0
  %9475 = vmatmul.mubr.bf16.gmra.mrb[0].mxu0 %v9440
  %v9476 = vpop.f32.mrb[0].mxu0
  %v9477 = vadd.f32 0.0, %v9476
  %v9478 = vpop.f32.mrb[0].mxu0
  %v9479 = vpop.f32.mrb[0].mxu0
  %v9480 = vpop.f32.mrb[0].mxu0
  %9481 = vdwg.mxu0
  %v9490 = vunpack.c.l.b16 %v8150
  %v9491 = vunpack.c.l.b16 %v8151
  %v9492 = vunpack.c.l.b16 %v8152
  %v9493 = vunpack.c.l.b16 %v8153
  %v9494 = vunpack.c.l.b16 %v8154
  %v9495 = vunpack.c.l.b16 %v8155
  %v9496 = vunpack.c.l.b16 %v8156
  %v9497 = vunpack.c.l.b16 %v8157
  %v9498 = vpack.c.b16 %v9491, %v9490
  %v9499 = vpack.c.b16 %v9493, %v9492
  %v9500 = vpack.c.b16 %v9495, %v9494
  %v9501 = vpack.c.b16 %v9497, %v9496
  %v9507 = vsel %vm8902, %v7987, 0
  %9509 = vmatprep.subr.bf16.mxu0 0
  %9510 = vmatpush1.bf16.msra.mxu0 %v9498
  %9511 = vmatprep.subr.bf16.mxu0 0
  %9512 = vmatpush1.bf16.msra.mxu0 %v9499
  %9513 = vmatprep.subr.bf16.mxu0 0
  %9514 = vmatpush1.bf16.msra.mxu0 %v9500
  %9515 = vmatprep.subr.bf16.mxu0 0
  %9516 = vmatpush1.bf16.msra.mxu0 %v9501
  %9517 = vmatprep.subr.bf16.mxu0 0
  %9518 = vmatpush1.bf16.msra.mxu0 0
  %9519 = vmatprep.subr.bf16.mxu0 0
  %9520 = vmatpush1.bf16.msra.mxu0 0
  %9521 = vmatprep.subr.bf16.mxu0 0
  %9522 = vmatpush1.bf16.msra.mxu0 0
  %9523 = vmatprep.subr.bf16.mxu0 0
  %9524 = vmatpush1.bf16.msra.mxu0 0
  %9525 = vmatprep.subr.bf16.mxu0 0
  %9526 = vmatpush1.bf16.msra.mxu0 0
  %9527 = vmatprep.subr.bf16.mxu0 0
  %9528 = vmatpush1.bf16.msra.mxu0 0
  %9529 = vmatprep.subr.bf16.mxu0 0
  %9530 = vmatpush1.bf16.msra.mxu0 0
  %9531 = vmatprep.subr.bf16.mxu0 0
  %9532 = vmatpush1.bf16.msra.mxu0 0
  %9533 = vmatprep.subr.bf16.mxu0 0
  %9534 = vmatpush1.bf16.msra.mxu0 0
  %9535 = vmatprep.subr.bf16.mxu0 0
  %9536 = vmatpush1.bf16.msra.mxu0 0
  %9537 = vmatprep.subr.bf16.mxu0 0
  %9538 = vmatpush1.bf16.msra.mxu0 0
  %9539 = vmatprep.subr.bf16.mxu0 0
  %9540 = vmatpush1.bf16.msra.mxu0 0
  %9541 = vmatprep.mubr.bf16.mxu0 0
  %9542 = vmatmul.mubr.bf16.gmra.mrb[0].mxu0 %v9507
  %v9543 = vpop.f32.mrb[0].mxu0
  %v9544 = vadd.f32 0.0, %v9543
  %v9545 = vpop.f32.mrb[0].mxu0
  %v9546 = vpop.f32.mrb[0].mxu0
  %v9547 = vpop.f32.mrb[0].mxu0
  %9548 = vdwg.mxu0
  %v9557 = vunpack.c.l.b16 %v8158
  %v9558 = vunpack.c.l.b16 %v8159
  %v9559 = vunpack.c.l.b16 %v8160
  %v9560 = vunpack.c.l.b16 %v8161
  %v9561 = vunpack.c.l.b16 %v8162
  %v9562 = vunpack.c.l.b16 %v8163
  %v9563 = vunpack.c.l.b16 %v8164
  %v9564 = vunpack.c.l.b16 %v8165
  %v9565 = vpack.c.b16 %v9558, %v9557
  %v9566 = vpack.c.b16 %v9560, %v9559
  %v9567 = vpack.c.b16 %v9562, %v9561
  %v9568 = vpack.c.b16 %v9564, %v9563
  %v9574 = vsel %vm8902, %v7988, 0
  %9576 = vmatprep.subr.bf16.mxu0 0
  %9577 = vmatpush1.bf16.msra.mxu0 %v9565
  %9578 = vmatprep.subr.bf16.mxu0 0
  %9579 = vmatpush1.bf16.msra.mxu0 %v9566
  %9580 = vmatprep.subr.bf16.mxu0 0
  %9581 = vmatpush1.bf16.msra.mxu0 %v9567
  %9582 = vmatprep.subr.bf16.mxu0 0
  %9583 = vmatpush1.bf16.msra.mxu0 %v9568
  %9584 = vmatprep.subr.bf16.mxu0 0
  %9585 = vmatpush1.bf16.msra.mxu0 0
  %9586 = vmatprep.subr.bf16.mxu0 0
  %9587 = vmatpush1.bf16.msra.mxu0 0
  %9588 = vmatprep.subr.bf16.mxu0 0
  %9589 = vmatpush1.bf16.msra.mxu0 0
  %9590 = vmatprep.subr.bf16.mxu0 0
  %9591 = vmatpush1.bf16.msra.mxu0 0
  %9592 = vmatprep.subr.bf16.mxu0 0
  %9593 = vmatpush1.bf16.msra.mxu0 0
  %9594 = vmatprep.subr.bf16.mxu0 0
  %9595 = vmatpush1.bf16.msra.mxu0 0
  %9596 = vmatprep.subr.bf16.mxu0 0
  %9597 = vmatpush1.bf16.msra.mxu0 0
  %9598 = vmatprep.subr.bf16.mxu0 0
  %9599 = vmatpush1.bf16.msra.mxu0 0
  %9600 = vmatprep.subr.bf16.mxu0 0
  %9601 = vmatpush1.bf16.msra.mxu0 0
  %9602 = vmatprep.subr.bf16.mxu0 0
  %9603 = vmatpush1.bf16.msra.mxu0 0
  %9604 = vmatprep.subr.bf16.mxu0 0
  %9605 = vmatpush1.bf16.msra.mxu0 0
  %9606 = vmatprep.subr.bf16.mxu0 0
  %9607 = vmatpush1.bf16.msra.mxu0 0
  %9608 = vmatprep.mubr.bf16.mxu0 0
  %9609 = vmatmul.mubr.bf16.gmra.mrb[0].mxu0 %v9574
  %v9610 = vpop.f32.mrb[0].mxu0
  %v9611 = vadd.f32 0.0, %v9610
  %v9612 = vpop.f32.mrb[0].mxu0
  %v9613 = vpop.f32.mrb[0].mxu0
  %v9614 = vpop.f32.mrb[0].mxu0
  %9615 = vdwg.mxu0
  %v9624 = vunpack.c.l.b16 %v8166
  %v9625 = vunpack.c.l.b16 %v8167
  %v9626 = vunpack.c.l.b16 %v8168
  %v9627 = vunpack.c.l.b16 %v8169
  %v9628 = vunpack.c.l.b16 %v8170
  %v9629 = vunpack.c.l.b16 %v8171
  %v9630 = vunpack.c.l.b16 %v8172
  %v9631 = vunpack.c.l.b16 %v8173
  %v9632 = vpack.c.b16 %v9625, %v9624
  %v9633 = vpack.c.b16 %v9627, %v9626
  %v9634 = vpack.c.b16 %v9629, %v9628
  %v9635 = vpack.c.b16 %v9631, %v9630
  %v9641 = vsel %vm8902, %v7989, 0
  %9643 = vmatprep.subr.bf16.mxu0 0
  %9644 = vmatpush1.bf16.msra.mxu0 %v9632
  %9645 = vmatprep.subr.bf16.mxu0 0
  %9646 = vmatpush1.bf16.msra.mxu0 %v9633
  %9647 = vmatprep.subr.bf16.mxu0 0
  %9648 = vmatpush1.bf16.msra.mxu0 %v9634
  %9649 = vmatprep.subr.bf16.mxu0 0
  %9650 = vmatpush1.bf16.msra.mxu0 %v9635
  %9651 = vmatprep.subr.bf16.mxu0 0
  %9652 = vmatpush1.bf16.msra.mxu0 0
  %9653 = vmatprep.subr.bf16.mxu0 0
  %9654 = vmatpush1.bf16.msra.mxu0 0
  %9655 = vmatprep.subr.bf16.mxu0 0
  %9656 = vmatpush1.bf16.msra.mxu0 0
  %9657 = vmatprep.subr.bf16.mxu0 0
  %9658 = vmatpush1.bf16.msra.mxu0 0
  %9659 = vmatprep.subr.bf16.mxu0 0
  %9660 = vmatpush1.bf16.msra.mxu0 0
  %9661 = vmatprep.subr.bf16.mxu0 0
  %9662 = vmatpush1.bf16.msra.mxu0 0
  %9663 = vmatprep.subr.bf16.mxu0 0
  %9664 = vmatpush1.bf16.msra.mxu0 0
  %9665 = vmatprep.subr.bf16.mxu0 0
  %9666 = vmatpush1.bf16.msra.mxu0 0
  %9667 = vmatprep.subr.bf16.mxu0 0
  %9668 = vmatpush1.bf16.msra.mxu0 0
  %9669 = vmatprep.subr.bf16.mxu0 0
  %9670 = vmatpush1.bf16.msra.mxu0 0
  %9671 = vmatprep.subr.bf16.mxu0 0
  %9672 = vmatpush1.bf16.msra.mxu0 0
  %9673 = vmatprep.subr.bf16.mxu0 0
  %9674 = vmatpush1.bf16.msra.mxu0 0
  %9675 = vmatprep.mubr.bf16.mxu0 0
  %9676 = vmatmul.mubr.bf16.gmra.mrb[0].mxu0 %v9641
  %v9677 = vpop.f32.mrb[0].mxu0
  %v9678 = vadd.f32 0.0, %v9677
  %v9679 = vpop.f32.mrb[0].mxu0
  %v9680 = vpop.f32.mrb[0].mxu0
  %v9681 = vpop.f32.mrb[0].mxu0
  %9682 = vdwg.mxu0
  %v9691 = vunpack.c.l.b16 %v8174
  %v9692 = vunpack.c.l.b16 %v8175
  %v9693 = vunpack.c.l.b16 %v8176
  %v9694 = vunpack.c.l.b16 %v8177
  %v9695 = vunpack.c.l.b16 %v8178
  %v9696 = vunpack.c.l.b16 %v8179
  %v9697 = vunpack.c.l.b16 %v8180
  %v9698 = vunpack.c.l.b16 %v8181
  %v9699 = vpack.c.b16 %v9692, %v9691
  %v9700 = vpack.c.b16 %v9694, %v9693
  %v9701 = vpack.c.b16 %v9696, %v9695
  %v9702 = vpack.c.b16 %v9698, %v9697
  %v9708 = vsel %vm8902, %v7990, 0
  %9710 = vmatprep.subr.bf16.mxu0 0
  %9711 = vmatpush1.bf16.msra.mxu0 %v9699
  %9712 = vmatprep.subr.bf16.mxu0 0
  %9713 = vmatpush1.bf16.msra.mxu0 %v9700
  %9714 = vmatprep.subr.bf16.mxu0 0
  %9715 = vmatpush1.bf16.msra.mxu0 %v9701
  %9716 = vmatprep.subr.bf16.mxu0 0
  %9717 = vmatpush1.bf16.msra.mxu0 %v9702
  %9718 = vmatprep.subr.bf16.mxu0 0
  %9719 = vmatpush1.bf16.msra.mxu0 0
  %9720 = vmatprep.subr.bf16.mxu0 0
  %9721 = vmatpush1.bf16.msra.mxu0 0
  %9722 = vmatprep.subr.bf16.mxu0 0
  %9723 = vmatpush1.bf16.msra.mxu0 0
  %9724 = vmatprep.subr.bf16.mxu0 0
  %9725 = vmatpush1.bf16.msra.mxu0 0
  %9726 = vmatprep.subr.bf16.mxu0 0
  %9727 = vmatpush1.bf16.msra.mxu0 0
  %9728 = vmatprep.subr.bf16.mxu0 0
  %9729 = vmatpush1.bf16.msra.mxu0 0
  %9730 = vmatprep.subr.bf16.mxu0 0
  %9731 = vmatpush1.bf16.msra.mxu0 0
  %9732 = vmatprep.subr.bf16.mxu0 0
  %9733 = vmatpush1.bf16.msra.mxu0 0
  %9734 = vmatprep.subr.bf16.mxu0 0
  %9735 = vmatpush1.bf16.msra.mxu0 0
  %9736 = vmatprep.subr.bf16.mxu0 0
  %9737 = vmatpush1.bf16.msra.mxu0 0
  %9738 = vmatprep.subr.bf16.mxu0 0
  %9739 = vmatpush1.bf16.msra.mxu0 0
  %9740 = vmatprep.subr.bf16.mxu0 0
  %9741 = vmatpush1.bf16.msra.mxu0 0
  %9742 = vmatprep.mubr.bf16.mxu0 0
  %9743 = vmatmul.mubr.bf16.gmra.mrb[0].mxu0 %v9708
  %v9744 = vpop.f32.mrb[0].mxu0
  %v9745 = vadd.f32 0.0, %v9744
  %v9746 = vpop.f32.mrb[0].mxu0
  %v9747 = vpop.f32.mrb[0].mxu0
  %v9748 = vpop.f32.mrb[0].mxu0
  %9749 = vdwg.mxu0
  %v9758 = vunpack.c.l.b16 %v8182
  %v9759 = vunpack.c.l.b16 %v8183
  %v9760 = vunpack.c.l.b16 %v8184
  %v9761 = vunpack.c.l.b16 %v8185
  %v9762 = vunpack.c.l.b16 %v8186
  %v9763 = vunpack.c.l.b16 %v8187
  %v9764 = vunpack.c.l.b16 %v8188
  %v9765 = vunpack.c.l.b16 %v8189
  %v9766 = vpack.c.b16 %v9759, %v9758
  %v9767 = vpack.c.b16 %v9761, %v9760
  %v9768 = vpack.c.b16 %v9763, %v9762
  %v9769 = vpack.c.b16 %v9765, %v9764
  %v9775 = vsel %vm8902, %v7991, 0
  %9777 = vmatprep.subr.bf16.mxu0 0
  %9778 = vmatpush1.bf16.msra.mxu0 %v9766
  %9779 = vmatprep.subr.bf16.mxu0 0
  %9780 = vmatpush1.bf16.msra.mxu0 %v9767
  %9781 = vmatprep.subr.bf16.mxu0 0
  %9782 = vmatpush1.bf16.msra.mxu0 %v9768
  %9783 = vmatprep.subr.bf16.mxu0 0
  %9784 = vmatpush1.bf16.msra.mxu0 %v9769
  %9785 = vmatprep.subr.bf16.mxu0 0
  %9786 = vmatpush1.bf16.msra.mxu0 0
  %9787 = vmatprep.subr.bf16.mxu0 0
  %9788 = vmatpush1.bf16.msra.mxu0 0
  %9789 = vmatprep.subr.bf16.mxu0 0
  %9790 = vmatpush1.bf16.msra.mxu0 0
  %9791 = vmatprep.subr.bf16.mxu0 0
  %9792 = vmatpush1.bf16.msra.mxu0 0
  %9793 = vmatprep.subr.bf16.mxu0 0
  %9794 = vmatpush1.bf16.msra.mxu0 0
  %9795 = vmatprep.subr.bf16.mxu0 0
  %9796 = vmatpush1.bf16.msra.mxu0 0
  %9797 = vmatprep.subr.bf16.mxu0 0
  %9798 = vmatpush1.bf16.msra.mxu0 0
  %9799 = vmatprep.subr.bf16.mxu0 0
  %9800 = vmatpush1.bf16.msra.mxu0 0
  %9801 = vmatprep.subr.bf16.mxu0 0
  %9802 = vmatpush1.bf16.msra.mxu0 0
  %9803 = vmatprep.subr.bf16.mxu0 0
  %9804 = vmatpush1.bf16.msra.mxu0 0
  %9805 = vmatprep.subr.bf16.mxu0 0
  %9806 = vmatpush1.bf16.msra.mxu0 0
  %9807 = vmatprep.subr.bf16.mxu0 0
  %9808 = vmatpush1.bf16.msra.mxu0 0
  %9809 = vmatprep.mubr.bf16.mxu0 0
  %9810 = vmatmul.mubr.bf16.gmra.mrb[0].mxu0 %v9775
  %v9811 = vpop.f32.mrb[0].mxu0
  %v9812 = vadd.f32 0.0, %v9811
  %v9813 = vpop.f32.mrb[0].mxu0
  %v9814 = vpop.f32.mrb[0].mxu0
  %v9815 = vpop.f32.mrb[0].mxu0
  %9816 = vdwg.mxu0
  %v9825 = vunpack.c.l.b16 %v8190
  %v9826 = vunpack.c.l.b16 %v8191
  %v9827 = vunpack.c.l.b16 %v8192
  %v9828 = vunpack.c.l.b16 %v8193
  %v9829 = vunpack.c.l.b16 %v8194
  %v9830 = vunpack.c.l.b16 %v8195
  %v9831 = vunpack.c.l.b16 %v8196
  %v9832 = vunpack.c.l.b16 %v8197
  %v9833 = vpack.c.b16 %v9826, %v9825
  %v9834 = vpack.c.b16 %v9828, %v9827
  %v9835 = vpack.c.b16 %v9830, %v9829
  %v9836 = vpack.c.b16 %v9832, %v9831
  %v9842 = vsel %vm8902, %v7992, 0
  %9844 = vmatprep.subr.bf16.mxu0 0
  %9845 = vmatpush1.bf16.msra.mxu0 %v9833
  %9846 = vmatprep.subr.bf16.mxu0 0
  %9847 = vmatpush1.bf16.msra.mxu0 %v9834
  %9848 = vmatprep.subr.bf16.mxu0 0
  %9849 = vmatpush1.bf16.msra.mxu0 %v9835
  %9850 = vmatprep.subr.bf16.mxu0 0
  %9851 = vmatpush1.bf16.msra.mxu0 %v9836
  %9852 = vmatprep.subr.bf16.mxu0 0
  %9853 = vmatpush1.bf16.msra.mxu0 0
  %9854 = vmatprep.subr.bf16.mxu0 0
  %9855 = vmatpush1.bf16.msra.mxu0 0
  %9856 = vmatprep.subr.bf16.mxu0 0
  %9857 = vmatpush1.bf16.msra.mxu0 0
  %9858 = vmatprep.subr.bf16.mxu0 0
  %9859 = vmatpush1.bf16.msra.mxu0 0
  %9860 = vmatprep.subr.bf16.mxu0 0
  %9861 = vmatpush1.bf16.msra.mxu0 0
  %9862 = vmatprep.subr.bf16.mxu0 0
  %9863 = vmatpush1.bf16.msra.mxu0 0
  %9864 = vmatprep.subr.bf16.mxu0 0
  %9865 = vmatpush1.bf16.msra.mxu0 0
  %9866 = vmatprep.subr.bf16.mxu0 0
  %9867 = vmatpush1.bf16.msra.mxu0 0
  %9868 = vmatprep.subr.bf16.mxu0 0
  %9869 = vmatpush1.bf16.msra.mxu0 0
  %9870 = vmatprep.subr.bf16.mxu0 0
  %9871 = vmatpush1.bf16.msra.mxu0 0
  %9872 = vmatprep.subr.bf16.mxu0 0
  %9873 = vmatpush1.bf16.msra.mxu0 0
  %9874 = vmatprep.subr.bf16.mxu0 0
  %9875 = vmatpush1.bf16.msra.mxu0 0
  %9876 = vmatprep.mubr.bf16.mxu0 0
  %9877 = vmatmul.mubr.bf16.gmra.mrb[0].mxu0 %v9842
  %v9878 = vpop.f32.mrb[0].mxu0
  %v9879 = vadd.f32 0.0, %v9878
  %v9880 = vpop.f32.mrb[0].mxu0
  %v9881 = vpop.f32.mrb[0].mxu0
  %v9882 = vpop.f32.mrb[0].mxu0
  %9883 = vdwg.mxu0
  %v9892 = vunpack.c.l.b16 %v8198
  %v9893 = vunpack.c.l.b16 %v8199
  %v9894 = vunpack.c.l.b16 %v8200
  %v9895 = vunpack.c.l.b16 %v8201
  %v9896 = vunpack.c.l.b16 %v8202
  %v9897 = vunpack.c.l.b16 %v8203
  %v9898 = vunpack.c.l.b16 %v8204
  %v9899 = vunpack.c.l.b16 %v8205
  %v9900 = vpack.c.b16 %v9893, %v9892
  %v9901 = vpack.c.b16 %v9895, %v9894
  %v9902 = vpack.c.b16 %v9897, %v9896
  %v9903 = vpack.c.b16 %v9899, %v9898
  %v9909 = vsel %vm8902, %v7993, 0
  %9911 = vmatprep.subr.bf16.mxu0 0
  %9912 = vmatpush1.bf16.msra.mxu0 %v9900
  %9913 = vmatprep.subr.bf16.mxu0 0
  %9914 = vmatpush1.bf16.msra.mxu0 %v9901
  %9915 = vmatprep.subr.bf16.mxu0 0
  %9916 = vmatpush1.bf16.msra.mxu0 %v9902
  %9917 = vmatprep.subr.bf16.mxu0 0
  %9918 = vmatpush1.bf16.msra.mxu0 %v9903
  %9919 = vmatprep.subr.bf16.mxu0 0
  %9920 = vmatpush1.bf16.msra.mxu0 0
  %9921 = vmatprep.subr.bf16.mxu0 0
  %9922 = vmatpush1.bf16.msra.mxu0 0
  %9923 = vmatprep.subr.bf16.mxu0 0
  %9924 = vmatpush1.bf16.msra.mxu0 0
  %9925 = vmatprep.subr.bf16.mxu0 0
  %9926 = vmatpush1.bf16.msra.mxu0 0
  %9927 = vmatprep.subr.bf16.mxu0 0
  %9928 = vmatpush1.bf16.msra.mxu0 0
  %9929 = vmatprep.subr.bf16.mxu0 0
  %9930 = vmatpush1.bf16.msra.mxu0 0
  %9931 = vmatprep.subr.bf16.mxu0 0
  %9932 = vmatpush1.bf16.msra.mxu0 0
  %9933 = vmatprep.subr.bf16.mxu0 0
  %9934 = vmatpush1.bf16.msra.mxu0 0
  %9935 = vmatprep.subr.bf16.mxu0 0
  %9936 = vmatpush1.bf16.msra.mxu0 0
  %9937 = vmatprep.subr.bf16.mxu0 0
  %9938 = vmatpush1.bf16.msra.mxu0 0
  %9939 = vmatprep.subr.bf16.mxu0 0
  %9940 = vmatpush1.bf16.msra.mxu0 0
  %9941 = vmatprep.subr.bf16.mxu0 0
  %9942 = vmatpush1.bf16.msra.mxu0 0
  %9943 = vmatprep.mubr.bf16.mxu0 0
  %9944 = vmatmul.mubr.bf16.gmra.mrb[0].mxu0 %v9909
  %v9945 = vpop.f32.mrb[0].mxu0
  %v9946 = vadd.f32 0.0, %v9945
  %v9947 = vpop.f32.mrb[0].mxu0
  %v9948 = vpop.f32.mrb[0].mxu0
  %v9949 = vpop.f32.mrb[0].mxu0
  %9950 = vdwg.mxu0
  %v9959 = vunpack.c.l.b16 %v8206
  %v9960 = vunpack.c.l.b16 %v8207
  %v9961 = vunpack.c.l.b16 %v8208
  %v9962 = vunpack.c.l.b16 %v8209
  %v9963 = vunpack.c.l.b16 %v8210
  %v9964 = vunpack.c.l.b16 %v8211
  %v9965 = vunpack.c.l.b16 %v8212
  %v9966 = vunpack.c.l.b16 %v8213
  %v9967 = vpack.c.b16 %v9960, %v9959
  %v9968 = vpack.c.b16 %v9962, %v9961
  %v9969 = vpack.c.b16 %v9964, %v9963
  %v9970 = vpack.c.b16 %v9966, %v9965
  %v9976 = vsel %vm8902, %v7994, 0
  %9978 = vmatprep.subr.bf16.mxu0 0
  %9979 = vmatpush1.bf16.msra.mxu0 %v9967
  %9980 = vmatprep.subr.bf16.mxu0 0
  %9981 = vmatpush1.bf16.msra.mxu0 %v9968
  %9982 = vmatprep.subr.bf16.mxu0 0
  %9983 = vmatpush1.bf16.msra.mxu0 %v9969
  %9984 = vmatprep.subr.bf16.mxu0 0
  %9985 = vmatpush1.bf16.msra.mxu0 %v9970
  %9986 = vmatprep.subr.bf16.mxu0 0
  %9987 = vmatpush1.bf16.msra.mxu0 0
  %9988 = vmatprep.subr.bf16.mxu0 0
  %9989 = vmatpush1.bf16.msra.mxu0 0
  %9990 = vmatprep.subr.bf16.mxu0 0
  %9991 = vmatpush1.bf16.msra.mxu0 0
  %9992 = vmatprep.subr.bf16.mxu0 0
  %9993 = vmatpush1.bf16.msra.mxu0 0
  %9994 = vmatprep.subr.bf16.mxu0 0
  %9995 = vmatpush1.bf16.msra.mxu0 0
  %9996 = vmatprep.subr.bf16.mxu0 0
  %9997 = vmatpush1.bf16.msra.mxu0 0
  %9998 = vmatprep.subr.bf16.mxu0 0
  %9999 = vmatpush1.bf16.msra.mxu0 0
  %10000 = vmatprep.subr.bf16.mxu0 0
  %10001 = vmatpush1.bf16.msra.mxu0 0
  %10002 = vmatprep.subr.bf16.mxu0 0
  %10003 = vmatpush1.bf16.msra.mxu0 0
  %10004 = vmatprep.subr.bf16.mxu0 0
  %10005 = vmatpush1.bf16.msra.mxu0 0
  %10006 = vmatprep.subr.bf16.mxu0 0
  %10007 = vmatpush1.bf16.msra.mxu0 0
  %10008 = vmatprep.subr.bf16.mxu0 0
  %10009 = vmatpush1.bf16.msra.mxu0 0
  %10010 = vmatprep.mubr.bf16.mxu0 0
  %10011 = vmatmul.mubr.bf16.gmra.mrb[0].mxu0 %v9976
  %v10012 = vpop.f32.mrb[0].mxu0
  %v10013 = vadd.f32 0.0, %v10012
  %v10014 = vpop.f32.mrb[0].mxu0
  %v10015 = vpop.f32.mrb[0].mxu0
  %v10016 = vpop.f32.mrb[0].mxu0
  %10017 = vdwg.mxu0
  %v10026 = vunpack.c.l.b16 %v8214
  %v10027 = vunpack.c.l.b16 %v8215
  %v10028 = vunpack.c.l.b16 %v8216
  %v10029 = vunpack.c.l.b16 %v8217
  %v10030 = vunpack.c.l.b16 %v8218
  %v10031 = vunpack.c.l.b16 %v8219
  %v10032 = vunpack.c.l.b16 %v8220
  %v10033 = vunpack.c.l.b16 %v8221
  %v10034 = vpack.c.b16 %v10027, %v10026
  %v10035 = vpack.c.b16 %v10029, %v10028
  %v10036 = vpack.c.b16 %v10031, %v10030
  %v10037 = vpack.c.b16 %v10033, %v10032
  %v10043 = vsel %vm8902, %v7995, 0
  %10045 = vmatprep.subr.bf16.mxu0 0
  %10046 = vmatpush1.bf16.msra.mxu0 %v10034
  %10047 = vmatprep.subr.bf16.mxu0 0
  %10048 = vmatpush1.bf16.msra.mxu0 %v10035
  %10049 = vmatprep.subr.bf16.mxu0 0
  %10050 = vmatpush1.bf16.msra.mxu0 %v10036
  %10051 = vmatprep.subr.bf16.mxu0 0
  %10052 = vmatpush1.bf16.msra.mxu0 %v10037
  %10053 = vmatprep.subr.bf16.mxu0 0
  %10054 = vmatpush1.bf16.msra.mxu0 0
  %10055 = vmatprep.subr.bf16.mxu0 0
  %10056 = vmatpush1.bf16.msra.mxu0 0
  %10057 = vmatprep.subr.bf16.mxu0 0
  %10058 = vmatpush1.bf16.msra.mxu0 0
  %10059 = vmatprep.subr.bf16.mxu0 0
  %10060 = vmatpush1.bf16.msra.mxu0 0
  %10061 = vmatprep.subr.bf16.mxu0 0
  %10062 = vmatpush1.bf16.msra.mxu0 0
  %10063 = vmatprep.subr.bf16.mxu0 0
  %10064 = vmatpush1.bf16.msra.mxu0 0
  %10065 = vmatprep.subr.bf16.mxu0 0
  %10066 = vmatpush1.bf16.msra.mxu0 0
  %10067 = vmatprep.subr.bf16.mxu0 0
  %10068 = vmatpush1.bf16.msra.mxu0 0
  %10069 = vmatprep.subr.bf16.mxu0 0
  %10070 = vmatpush1.bf16.msra.mxu0 0
  %10071 = vmatprep.subr.bf16.mxu0 0
  %10072 = vmatpush1.bf16.msra.mxu0 0
  %10073 = vmatprep.subr.bf16.mxu0 0
  %10074 = vmatpush1.bf16.msra.mxu0 0
  %10075 = vmatprep.subr.bf16.mxu0 0
  %10076 = vmatpush1.bf16.msra.mxu0 0
  %10077 = vmatprep.mubr.bf16.mxu0 0
  %10078 = vmatmul.mubr.bf16.gmra.mrb[0].mxu0 %v10043
  %v10079 = vpop.f32.mrb[0].mxu0
  %v10080 = vadd.f32 0.0, %v10079
  %v10081 = vpop.f32.mrb[0].mxu0
  %v10082 = vpop.f32.mrb[0].mxu0
  %v10083 = vpop.f32.mrb[0].mxu0
  %10084 = vdwg.mxu0
  %v10093 = vunpack.c.l.b16 %v8222
  %v10094 = vunpack.c.l.b16 %v8223
  %v10095 = vunpack.c.l.b16 %v8224
  %v10096 = vunpack.c.l.b16 %v8225
  %v10097 = vunpack.c.l.b16 %v8226
  %v10098 = vunpack.c.l.b16 %v8227
  %v10099 = vunpack.c.l.b16 %v8228
  %v10100 = vunpack.c.l.b16 %v8229
  %v10101 = vpack.c.b16 %v10094, %v10093
  %v10102 = vpack.c.b16 %v10096, %v10095
  %v10103 = vpack.c.b16 %v10098, %v10097
  %v10104 = vpack.c.b16 %v10100, %v10099
  %v10110 = vsel %vm8902, %v7996, 0
  %10112 = vmatprep.subr.bf16.mxu0 0
  %10113 = vmatpush1.bf16.msra.mxu0 %v10101
  %10114 = vmatprep.subr.bf16.mxu0 0
  %10115 = vmatpush1.bf16.msra.mxu0 %v10102
  %10116 = vmatprep.subr.bf16.mxu0 0
  %10117 = vmatpush1.bf16.msra.mxu0 %v10103
  %10118 = vmatprep.subr.bf16.mxu0 0
  %10119 = vmatpush1.bf16.msra.mxu0 %v10104
  %10120 = vmatprep.subr.bf16.mxu0 0
  %10121 = vmatpush1.bf16.msra.mxu0 0
  %10122 = vmatprep.subr.bf16.mxu0 0
  %10123 = vmatpush1.bf16.msra.mxu0 0
  %10124 = vmatprep.subr.bf16.mxu0 0
  %10125 = vmatpush1.bf16.msra.mxu0 0
  %10126 = vmatprep.subr.bf16.mxu0 0
  %10127 = vmatpush1.bf16.msra.mxu0 0
  %10128 = vmatprep.subr.bf16.mxu0 0
  %10129 = vmatpush1.bf16.msra.mxu0 0
  %10130 = vmatprep.subr.bf16.mxu0 0
  %10131 = vmatpush1.bf16.msra.mxu0 0
  %10132 = vmatprep.subr.bf16.mxu0 0
  %10133 = vmatpush1.bf16.msra.mxu0 0
  %10134 = vmatprep.subr.bf16.mxu0 0
  %10135 = vmatpush1.bf16.msra.mxu0 0
  %10136 = vmatprep.subr.bf16.mxu0 0
  %10137 = vmatpush1.bf16.msra.mxu0 0
  %10138 = vmatprep.subr.bf16.mxu0 0
  %10139 = vmatpush1.bf16.msra.mxu0 0
  %10140 = vmatprep.subr.bf16.mxu0 0
  %10141 = vmatpush1.bf16.msra.mxu0 0
  %10142 = vmatprep.subr.bf16.mxu0 0
  %10143 = vmatpush1.bf16.msra.mxu0 0
  %10144 = vmatprep.mubr.bf16.mxu0 0
  %10145 = vmatmul.mubr.bf16.gmra.mrb[0].mxu0 %v10110
  %v10146 = vpop.f32.mrb[0].mxu0
  %v10147 = vadd.f32 0.0, %v10146
  %v10148 = vpop.f32.mrb[0].mxu0
  %v10149 = vpop.f32.mrb[0].mxu0
  %v10150 = vpop.f32.mrb[0].mxu0
  %10151 = vdwg.mxu0
  %v10160 = vunpack.c.l.b16 %v8230
  %v10161 = vunpack.c.l.b16 %v8231
  %v10162 = vunpack.c.l.b16 %v8232
  %v10163 = vunpack.c.l.b16 %v8233
  %v10164 = vunpack.c.l.b16 %v8234
  %v10165 = vunpack.c.l.b16 %v8235
  %v10166 = vunpack.c.l.b16 %v8236
  %v10167 = vunpack.c.l.b16 %v8237
  %v10168 = vpack.c.b16 %v10161, %v10160
  %v10169 = vpack.c.b16 %v10163, %v10162
  %v10170 = vpack.c.b16 %v10165, %v10164
  %v10171 = vpack.c.b16 %v10167, %v10166
  %v10177 = vsel %vm8902, %v7997, 0
  %10179 = vmatprep.subr.bf16.mxu0 0
  %10180 = vmatpush1.bf16.msra.mxu0 %v10168
  %10181 = vmatprep.subr.bf16.mxu0 0
  %10182 = vmatpush1.bf16.msra.mxu0 %v10169
  %10183 = vmatprep.subr.bf16.mxu0 0
  %10184 = vmatpush1.bf16.msra.mxu0 %v10170
  %10185 = vmatprep.subr.bf16.mxu0 0
  %10186 = vmatpush1.bf16.msra.mxu0 %v10171
  %10187 = vmatprep.subr.bf16.mxu0 0
  %10188 = vmatpush1.bf16.msra.mxu0 0
  %10189 = vmatprep.subr.bf16.mxu0 0
  %10190 = vmatpush1.bf16.msra.mxu0 0
  %10191 = vmatprep.subr.bf16.mxu0 0
  %10192 = vmatpush1.bf16.msra.mxu0 0
  %10193 = vmatprep.subr.bf16.mxu0 0
  %10194 = vmatpush1.bf16.msra.mxu0 0
  %10195 = vmatprep.subr.bf16.mxu0 0
  %10196 = vmatpush1.bf16.msra.mxu0 0
  %10197 = vmatprep.subr.bf16.mxu0 0
  %10198 = vmatpush1.bf16.msra.mxu0 0
  %10199 = vmatprep.subr.bf16.mxu0 0
  %10200 = vmatpush1.bf16.msra.mxu0 0
  %10201 = vmatprep.subr.bf16.mxu0 0
  %10202 = vmatpush1.bf16.msra.mxu0 0
  %10203 = vmatprep.subr.bf16.mxu0 0
  %10204 = vmatpush1.bf16.msra.mxu0 0
  %10205 = vmatprep.subr.bf16.mxu0 0
  %10206 = vmatpush1.bf16.msra.mxu0 0
  %10207 = vmatprep.subr.bf16.mxu0 0
  %10208 = vmatpush1.bf16.msra.mxu0 0
  %10209 = vmatprep.subr.bf16.mxu0 0
  %10210 = vmatpush1.bf16.msra.mxu0 0
  %10211 = vmatprep.mubr.bf16.mxu0 0
  %10212 = vmatmul.mubr.bf16.gmra.mrb[0].mxu0 %v10177
  %v10213 = vpop.f32.mrb[0].mxu0
  %v10214 = vadd.f32 0.0, %v10213
  %v10215 = vpop.f32.mrb[0].mxu0
  %v10216 = vpop.f32.mrb[0].mxu0
  %v10217 = vpop.f32.mrb[0].mxu0
  %10218 = vdwg.mxu0
  %v10227 = vunpack.c.l.b16 %v8238
  %v10228 = vunpack.c.l.b16 %v8239
  %v10229 = vunpack.c.l.b16 %v8240
  %v10230 = vunpack.c.l.b16 %v8241
  %v10231 = vunpack.c.l.b16 %v8242
  %v10232 = vunpack.c.l.b16 %v8243
  %v10233 = vunpack.c.l.b16 %v8244
  %v10234 = vunpack.c.l.b16 %v8245
  %v10235 = vpack.c.b16 %v10228, %v10227
  %v10236 = vpack.c.b16 %v10230, %v10229
  %v10237 = vpack.c.b16 %v10232, %v10231
  %v10238 = vpack.c.b16 %v10234, %v10233
  %v10244 = vsel %vm8902, %v7998, 0
  %10246 = vmatprep.subr.bf16.mxu0 0
  %10247 = vmatpush1.bf16.msra.mxu0 %v10235
  %10248 = vmatprep.subr.bf16.mxu0 0
  %10249 = vmatpush1.bf16.msra.mxu0 %v10236
  %10250 = vmatprep.subr.bf16.mxu0 0
  %10251 = vmatpush1.bf16.msra.mxu0 %v10237
  %10252 = vmatprep.subr.bf16.mxu0 0
  %10253 = vmatpush1.bf16.msra.mxu0 %v10238
  %10254 = vmatprep.subr.bf16.mxu0 0
  %10255 = vmatpush1.bf16.msra.mxu0 0
  %10256 = vmatprep.subr.bf16.mxu0 0
  %10257 = vmatpush1.bf16.msra.mxu0 0
  %10258 = vmatprep.subr.bf16.mxu0 0
  %10259 = vmatpush1.bf16.msra.mxu0 0
  %10260 = vmatprep.subr.bf16.mxu0 0
  %10261 = vmatpush1.bf16.msra.mxu0 0
  %10262 = vmatprep.subr.bf16.mxu0 0
  %10263 = vmatpush1.bf16.msra.mxu0 0
  %10264 = vmatprep.subr.bf16.mxu0 0
  %10265 = vmatpush1.bf16.msra.mxu0 0
  %10266 = vmatprep.subr.bf16.mxu0 0
  %10267 = vmatpush1.bf16.msra.mxu0 0
  %10268 = vmatprep.subr.bf16.mxu0 0
  %10269 = vmatpush1.bf16.msra.mxu0 0
  %10270 = vmatprep.subr.bf16.mxu0 0
  %10271 = vmatpush1.bf16.msra.mxu0 0
  %10272 = vmatprep.subr.bf16.mxu0 0
  %10273 = vmatpush1.bf16.msra.mxu0 0
  %10274 = vmatprep.subr.bf16.mxu0 0
  %10275 = vmatpush1.bf16.msra.mxu0 0
  %10276 = vmatprep.subr.bf16.mxu0 0
  %10277 = vmatpush1.bf16.msra.mxu0 0
  %10278 = vmatprep.mubr.bf16.mxu0 0
  %10279 = vmatmul.mubr.bf16.gmra.mrb[0].mxu0 %v10244
  %v10280 = vpop.f32.mrb[0].mxu0
  %v10281 = vadd.f32 0.0, %v10280
  %v10282 = vpop.f32.mrb[0].mxu0
  %v10283 = vpop.f32.mrb[0].mxu0
  %v10284 = vpop.f32.mrb[0].mxu0
  %10285 = vdwg.mxu0
  %v10294 = vunpack.c.l.b16 %v8246
  %v10295 = vunpack.c.l.b16 %v8247
  %v10296 = vunpack.c.l.b16 %v8248
  %v10297 = vunpack.c.l.b16 %v8249
  %v10298 = vunpack.c.l.b16 %v8250
  %v10299 = vunpack.c.l.b16 %v8251
  %v10300 = vunpack.c.l.b16 %v8252
  %v10301 = vunpack.c.l.b16 %v8253
  %v10302 = vpack.c.b16 %v10295, %v10294
  %v10303 = vpack.c.b16 %v10297, %v10296
  %v10304 = vpack.c.b16 %v10299, %v10298
  %v10305 = vpack.c.b16 %v10301, %v10300
  %v10311 = vsel %vm8902, %v7999, 0
  %10313 = vmatprep.subr.bf16.mxu0 0
  %10314 = vmatpush1.bf16.msra.mxu0 %v10302
  %10315 = vmatprep.subr.bf16.mxu0 0
  %10316 = vmatpush1.bf16.msra.mxu0 %v10303
  %10317 = vmatprep.subr.bf16.mxu0 0
  %10318 = vmatpush1.bf16.msra.mxu0 %v10304
  %10319 = vmatprep.subr.bf16.mxu0 0
  %10320 = vmatpush1.bf16.msra.mxu0 %v10305
  %10321 = vmatprep.subr.bf16.mxu0 0
  %10322 = vmatpush1.bf16.msra.mxu0 0
  %10323 = vmatprep.subr.bf16.mxu0 0
  %10324 = vmatpush1.bf16.msra.mxu0 0
  %10325 = vmatprep.subr.bf16.mxu0 0
  %10326 = vmatpush1.bf16.msra.mxu0 0
  %10327 = vmatprep.subr.bf16.mxu0 0
  %10328 = vmatpush1.bf16.msra.mxu0 0
  %10329 = vmatprep.subr.bf16.mxu0 0
  %10330 = vmatpush1.bf16.msra.mxu0 0
  %10331 = vmatprep.subr.bf16.mxu0 0
  %10332 = vmatpush1.bf16.msra.mxu0 0
  %10333 = vmatprep.subr.bf16.mxu0 0
  %10334 = vmatpush1.bf16.msra.mxu0 0
  %10335 = vmatprep.subr.bf16.mxu0 0
  %10336 = vmatpush1.bf16.msra.mxu0 0
  %10337 = vmatprep.subr.bf16.mxu0 0
  %10338 = vmatpush1.bf16.msra.mxu0 0
  %10339 = vmatprep.subr.bf16.mxu0 0
  %10340 = vmatpush1.bf16.msra.mxu0 0
  %10341 = vmatprep.subr.bf16.mxu0 0
  %10342 = vmatpush1.bf16.msra.mxu0 0
  %10343 = vmatprep.subr.bf16.mxu0 0
  %10344 = vmatpush1.bf16.msra.mxu0 0
  %10345 = vmatprep.mubr.bf16.mxu0 0
  %10346 = vmatmul.mubr.bf16.gmra.mrb[0].mxu0 %v10311
  %v10347 = vpop.f32.mrb[0].mxu0
  %v10348 = vadd.f32 0.0, %v10347
  %v10349 = vpop.f32.mrb[0].mxu0
  %v10350 = vpop.f32.mrb[0].mxu0
  %v10351 = vpop.f32.mrb[0].mxu0
  %10352 = vdwg.mxu0
  %v10361 = vunpack.c.l.b16 %v8254
  %v10362 = vunpack.c.l.b16 %v8255
  %v10363 = vunpack.c.l.b16 %v8256
  %v10364 = vunpack.c.l.b16 %v8257
  %v10365 = vunpack.c.l.b16 %v8258
  %v10366 = vunpack.c.l.b16 %v8259
  %v10367 = vunpack.c.l.b16 %v8260
  %v10368 = vunpack.c.l.b16 %v8261
  %v10369 = vpack.c.b16 %v10362, %v10361
  %v10370 = vpack.c.b16 %v10364, %v10363
  %v10371 = vpack.c.b16 %v10366, %v10365
  %v10372 = vpack.c.b16 %v10368, %v10367
  %v10378 = vsel %vm8902, %v8000, 0
  %10380 = vmatprep.subr.bf16.mxu0 0
  %10381 = vmatpush1.bf16.msra.mxu0 %v10369
  %10382 = vmatprep.subr.bf16.mxu0 0
  %10383 = vmatpush1.bf16.msra.mxu0 %v10370
  %10384 = vmatprep.subr.bf16.mxu0 0
  %10385 = vmatpush1.bf16.msra.mxu0 %v10371
  %10386 = vmatprep.subr.bf16.mxu0 0
  %10387 = vmatpush1.bf16.msra.mxu0 %v10372
  %10388 = vmatprep.subr.bf16.mxu0 0
  %10389 = vmatpush1.bf16.msra.mxu0 0
  %10390 = vmatprep.subr.bf16.mxu0 0
  %10391 = vmatpush1.bf16.msra.mxu0 0
  %10392 = vmatprep.subr.bf16.mxu0 0
  %10393 = vmatpush1.bf16.msra.mxu0 0
  %10394 = vmatprep.subr.bf16.mxu0 0
  %10395 = vmatpush1.bf16.msra.mxu0 0
  %10396 = vmatprep.subr.bf16.mxu0 0
  %10397 = vmatpush1.bf16.msra.mxu0 0
  %10398 = vmatprep.subr.bf16.mxu0 0
  %10399 = vmatpush1.bf16.msra.mxu0 0
  %10400 = vmatprep.subr.bf16.mxu0 0
  %10401 = vmatpush1.bf16.msra.mxu0 0
  %10402 = vmatprep.subr.bf16.mxu0 0
  %10403 = vmatpush1.bf16.msra.mxu0 0
  %10404 = vmatprep.subr.bf16.mxu0 0
  %10405 = vmatpush1.bf16.msra.mxu0 0
  %10406 = vmatprep.subr.bf16.mxu0 0
  %10407 = vmatpush1.bf16.msra.mxu0 0
  %10408 = vmatprep.subr.bf16.mxu0 0
  %10409 = vmatpush1.bf16.msra.mxu0 0
  %10410 = vmatprep.subr.bf16.mxu0 0
  %10411 = vmatpush1.bf16.msra.mxu0 0
  %10412 = vmatprep.mubr.bf16.mxu0 0
  %10413 = vmatmul.mubr.bf16.gmra.mrb[0].mxu0 %v10378
  %v10414 = vpop.f32.mrb[0].mxu0
  %v10415 = vadd.f32 0.0, %v10414
  %v10416 = vpop.f32.mrb[0].mxu0
  %v10417 = vpop.f32.mrb[0].mxu0
  %v10418 = vpop.f32.mrb[0].mxu0
  %10419 = vdwg.mxu0
  %v10428 = vunpack.c.l.b16 %v8262
  %v10429 = vunpack.c.l.b16 %v8263
  %v10430 = vunpack.c.l.b16 %v8264
  %v10431 = vunpack.c.l.b16 %v8265
  %v10432 = vunpack.c.l.b16 %v8266
  %v10433 = vunpack.c.l.b16 %v8267
  %v10434 = vunpack.c.l.b16 %v8268
  %v10435 = vunpack.c.l.b16 %v8269
  %v10436 = vpack.c.b16 %v10429, %v10428
  %v10437 = vpack.c.b16 %v10431, %v10430
  %v10438 = vpack.c.b16 %v10433, %v10432
  %v10439 = vpack.c.b16 %v10435, %v10434
  %v10445 = vsel %vm8902, %v8001, 0
  %10447 = vmatprep.subr.bf16.mxu0 0
  %10448 = vmatpush1.bf16.msra.mxu0 %v10436
  %10449 = vmatprep.subr.bf16.mxu0 0
  %10450 = vmatpush1.bf16.msra.mxu0 %v10437
  %10451 = vmatprep.subr.bf16.mxu0 0
  %10452 = vmatpush1.bf16.msra.mxu0 %v10438
  %10453 = vmatprep.subr.bf16.mxu0 0
  %10454 = vmatpush1.bf16.msra.mxu0 %v10439
  %10455 = vmatprep.subr.bf16.mxu0 0
  %10456 = vmatpush1.bf16.msra.mxu0 0
  %10457 = vmatprep.subr.bf16.mxu0 0
  %10458 = vmatpush1.bf16.msra.mxu0 0
  %10459 = vmatprep.subr.bf16.mxu0 0
  %10460 = vmatpush1.bf16.msra.mxu0 0
  %10461 = vmatprep.subr.bf16.mxu0 0
  %10462 = vmatpush1.bf16.msra.mxu0 0
  %10463 = vmatprep.subr.bf16.mxu0 0
  %10464 = vmatpush1.bf16.msra.mxu0 0
  %10465 = vmatprep.subr.bf16.mxu0 0
  %10466 = vmatpush1.bf16.msra.mxu0 0
  %10467 = vmatprep.subr.bf16.mxu0 0
  %10468 = vmatpush1.bf16.msra.mxu0 0
  %10469 = vmatprep.subr.bf16.mxu0 0
  %10470 = vmatpush1.bf16.msra.mxu0 0
  %10471 = vmatprep.subr.bf16.mxu0 0
  %10472 = vmatpush1.bf16.msra.mxu0 0
  %10473 = vmatprep.subr.bf16.mxu0 0
  %10474 = vmatpush1.bf16.msra.mxu0 0
  %10475 = vmatprep.subr.bf16.mxu0 0
  %10476 = vmatpush1.bf16.msra.mxu0 0
  %10477 = vmatprep.subr.bf16.mxu0 0
  %10478 = vmatpush1.bf16.msra.mxu0 0
  %10479 = vmatprep.mubr.bf16.mxu0 0
  %10480 = vmatmul.mubr.bf16.gmra.mrb[0].mxu0 %v10445
  %v10481 = vpop.f32.mrb[0].mxu0
  %v10482 = vadd.f32 0.0, %v10481
  %v10483 = vpop.f32.mrb[0].mxu0
  %v10484 = vpop.f32.mrb[0].mxu0
  %v10485 = vpop.f32.mrb[0].mxu0
  %10486 = vdwg.mxu0
  %v10495 = vunpack.c.l.b16 %v8270
  %v10496 = vunpack.c.l.b16 %v8271
  %v10497 = vunpack.c.l.b16 %v8272
  %v10498 = vunpack.c.l.b16 %v8273
  %v10499 = vunpack.c.l.b16 %v8274
  %v10500 = vunpack.c.l.b16 %v8275
  %v10501 = vunpack.c.l.b16 %v8276
  %v10502 = vunpack.c.l.b16 %v8277
  %v10503 = vpack.c.b16 %v10496, %v10495
  %v10504 = vpack.c.b16 %v10498, %v10497
  %v10505 = vpack.c.b16 %v10500, %v10499
  %v10506 = vpack.c.b16 %v10502, %v10501
  %v10512 = vsel %vm8902, %v8002, 0
  %10514 = vmatprep.subr.bf16.mxu0 0
  %10515 = vmatpush1.bf16.msra.mxu0 %v10503
  %10516 = vmatprep.subr.bf16.mxu0 0
  %10517 = vmatpush1.bf16.msra.mxu0 %v10504
  %10518 = vmatprep.subr.bf16.mxu0 0
  %10519 = vmatpush1.bf16.msra.mxu0 %v10505
  %10520 = vmatprep.subr.bf16.mxu0 0
  %10521 = vmatpush1.bf16.msra.mxu0 %v10506
  %10522 = vmatprep.subr.bf16.mxu0 0
  %10523 = vmatpush1.bf16.msra.mxu0 0
  %10524 = vmatprep.subr.bf16.mxu0 0
  %10525 = vmatpush1.bf16.msra.mxu0 0
  %10526 = vmatprep.subr.bf16.mxu0 0
  %10527 = vmatpush1.bf16.msra.mxu0 0
  %10528 = vmatprep.subr.bf16.mxu0 0
  %10529 = vmatpush1.bf16.msra.mxu0 0
  %10530 = vmatprep.subr.bf16.mxu0 0
  %10531 = vmatpush1.bf16.msra.mxu0 0
  %10532 = vmatprep.subr.bf16.mxu0 0
  %10533 = vmatpush1.bf16.msra.mxu0 0
  %10534 = vmatprep.subr.bf16.mxu0 0
  %10535 = vmatpush1.bf16.msra.mxu0 0
  %10536 = vmatprep.subr.bf16.mxu0 0
  %10537 = vmatpush1.bf16.msra.mxu0 0
  %10538 = vmatprep.subr.bf16.mxu0 0
  %10539 = vmatpush1.bf16.msra.mxu0 0
  %10540 = vmatprep.subr.bf16.mxu0 0
  %10541 = vmatpush1.bf16.msra.mxu0 0
  %10542 = vmatprep.subr.bf16.mxu0 0
  %10543 = vmatpush1.bf16.msra.mxu0 0
  %10544 = vmatprep.subr.bf16.mxu0 0
  %10545 = vmatpush1.bf16.msra.mxu0 0
  %10546 = vmatprep.mubr.bf16.mxu0 0
  %10547 = vmatmul.mubr.bf16.gmra.mrb[0].mxu0 %v10512
  %v10548 = vpop.f32.mrb[0].mxu0
  %v10549 = vadd.f32 0.0, %v10548
  %v10550 = vpop.f32.mrb[0].mxu0
  %v10551 = vpop.f32.mrb[0].mxu0
  %v10552 = vpop.f32.mrb[0].mxu0
  %10553 = vdwg.mxu0
  %v10562 = vunpack.c.l.b16 %v8278
  %v10563 = vunpack.c.l.b16 %v8279
  %v10564 = vunpack.c.l.b16 %v8280
  %v10565 = vunpack.c.l.b16 %v8281
  %v10566 = vunpack.c.l.b16 %v8282
  %v10567 = vunpack.c.l.b16 %v8283
  %v10568 = vunpack.c.l.b16 %v8284
  %v10569 = vunpack.c.l.b16 %v8285
  %v10570 = vpack.c.b16 %v10563, %v10562
  %v10571 = vpack.c.b16 %v10565, %v10564
  %v10572 = vpack.c.b16 %v10567, %v10566
  %v10573 = vpack.c.b16 %v10569, %v10568
  %v10579 = vsel %vm8902, %v8003, 0
  %10581 = vmatprep.subr.bf16.mxu0 0
  %10582 = vmatpush1.bf16.msra.mxu0 %v10570
  %10583 = vmatprep.subr.bf16.mxu0 0
  %10584 = vmatpush1.bf16.msra.mxu0 %v10571
  %10585 = vmatprep.subr.bf16.mxu0 0
  %10586 = vmatpush1.bf16.msra.mxu0 %v10572
  %10587 = vmatprep.subr.bf16.mxu0 0
  %10588 = vmatpush1.bf16.msra.mxu0 %v10573
  %10589 = vmatprep.subr.bf16.mxu0 0
  %10590 = vmatpush1.bf16.msra.mxu0 0
  %10591 = vmatprep.subr.bf16.mxu0 0
  %10592 = vmatpush1.bf16.msra.mxu0 0
  %10593 = vmatprep.subr.bf16.mxu0 0
  %10594 = vmatpush1.bf16.msra.mxu0 0
  %10595 = vmatprep.subr.bf16.mxu0 0
  %10596 = vmatpush1.bf16.msra.mxu0 0
  %10597 = vmatprep.subr.bf16.mxu0 0
  %10598 = vmatpush1.bf16.msra.mxu0 0
  %10599 = vmatprep.subr.bf16.mxu0 0
  %10600 = vmatpush1.bf16.msra.mxu0 0
  %10601 = vmatprep.subr.bf16.mxu0 0
  %10602 = vmatpush1.bf16.msra.mxu0 0
  %10603 = vmatprep.subr.bf16.mxu0 0
  %10604 = vmatpush1.bf16.msra.mxu0 0
  %10605 = vmatprep.subr.bf16.mxu0 0
  %10606 = vmatpush1.bf16.msra.mxu0 0
  %10607 = vmatprep.subr.bf16.mxu0 0
  %10608 = vmatpush1.bf16.msra.mxu0 0
  %10609 = vmatprep.subr.bf16.mxu0 0
  %10610 = vmatpush1.bf16.msra.mxu0 0
  %10611 = vmatprep.subr.bf16.mxu0 0
  %10612 = vmatpush1.bf16.msra.mxu0 0
  %10613 = vmatprep.mubr.bf16.mxu0 0
  %10614 = vmatmul.mubr.bf16.gmra.mrb[0].mxu0 %v10579
  %v10615 = vpop.f32.mrb[0].mxu0
  %v10616 = vadd.f32 0.0, %v10615
  %v10617 = vpop.f32.mrb[0].mxu0
  %v10618 = vpop.f32.mrb[0].mxu0
  %v10619 = vpop.f32.mrb[0].mxu0
  %10620 = vdwg.mxu0
  %v10629 = vunpack.c.l.b16 %v8286
  %v10630 = vunpack.c.l.b16 %v8287
  %v10631 = vunpack.c.l.b16 %v8288
  %v10632 = vunpack.c.l.b16 %v8289
  %v10633 = vunpack.c.l.b16 %v8290
  %v10634 = vunpack.c.l.b16 %v8291
  %v10635 = vunpack.c.l.b16 %v8292
  %v10636 = vunpack.c.l.b16 %v8293
  %v10637 = vpack.c.b16 %v10630, %v10629
  %v10638 = vpack.c.b16 %v10632, %v10631
  %v10639 = vpack.c.b16 %v10634, %v10633
  %v10640 = vpack.c.b16 %v10636, %v10635
  %v10646 = vsel %vm8902, %v8004, 0
  %10648 = vmatprep.subr.bf16.mxu0 0
  %10649 = vmatpush1.bf16.msra.mxu0 %v10637
  %10650 = vmatprep.subr.bf16.mxu0 0
  %10651 = vmatpush1.bf16.msra.mxu0 %v10638
  %10652 = vmatprep.subr.bf16.mxu0 0
  %10653 = vmatpush1.bf16.msra.mxu0 %v10639
  %10654 = vmatprep.subr.bf16.mxu0 0
  %10655 = vmatpush1.bf16.msra.mxu0 %v10640
  %10656 = vmatprep.subr.bf16.mxu0 0
  %10657 = vmatpush1.bf16.msra.mxu0 0
  %10658 = vmatprep.subr.bf16.mxu0 0
  %10659 = vmatpush1.bf16.msra.mxu0 0
  %10660 = vmatprep.subr.bf16.mxu0 0
  %10661 = vmatpush1.bf16.msra.mxu0 0
  %10662 = vmatprep.subr.bf16.mxu0 0
  %10663 = vmatpush1.bf16.msra.mxu0 0
  %10664 = vmatprep.subr.bf16.mxu0 0
  %10665 = vmatpush1.bf16.msra.mxu0 0
  %10666 = vmatprep.subr.bf16.mxu0 0
  %10667 = vmatpush1.bf16.msra.mxu0 0
  %10668 = vmatprep.subr.bf16.mxu0 0
  %10669 = vmatpush1.bf16.msra.mxu0 0
  %10670 = vmatprep.subr.bf16.mxu0 0
  %10671 = vmatpush1.bf16.msra.mxu0 0
  %10672 = vmatprep.subr.bf16.mxu0 0
  %10673 = vmatpush1.bf16.msra.mxu0 0
  %10674 = vmatprep.subr.bf16.mxu0 0
  %10675 = vmatpush1.bf16.msra.mxu0 0
  %10676 = vmatprep.subr.bf16.mxu0 0
  %10677 = vmatpush1.bf16.msra.mxu0 0
  %10678 = vmatprep.subr.bf16.mxu0 0
  %10679 = vmatpush1.bf16.msra.mxu0 0
  %10680 = vmatprep.mubr.bf16.mxu0 0
  %10681 = vmatmul.mubr.bf16.gmra.mrb[0].mxu0 %v10646
  %v10682 = vpop.f32.mrb[0].mxu0
  %v10683 = vadd.f32 0.0, %v10682
  %v10684 = vpop.f32.mrb[0].mxu0
  %v10685 = vpop.f32.mrb[0].mxu0
  %v10686 = vpop.f32.mrb[0].mxu0
  %10687 = vdwg.mxu0
  %v10696 = vunpack.c.l.b16 %v8294
  %v10697 = vunpack.c.l.b16 %v8295
  %v10698 = vunpack.c.l.b16 %v8296
  %v10699 = vunpack.c.l.b16 %v8297
  %v10700 = vunpack.c.l.b16 %v8298
  %v10701 = vunpack.c.l.b16 %v8299
  %v10702 = vunpack.c.l.b16 %v8300
  %v10703 = vunpack.c.l.b16 %v8301
  %v10704 = vpack.c.b16 %v10697, %v10696
  %v10705 = vpack.c.b16 %v10699, %v10698
  %v10706 = vpack.c.b16 %v10701, %v10700
  %v10707 = vpack.c.b16 %v10703, %v10702
  %v10713 = vsel %vm8902, %v8005, 0
  %10715 = vmatprep.subr.bf16.mxu0 0
  %10716 = vmatpush1.bf16.msra.mxu0 %v10704
  %10717 = vmatprep.subr.bf16.mxu0 0
  %10718 = vmatpush1.bf16.msra.mxu0 %v10705
  %10719 = vmatprep.subr.bf16.mxu0 0
  %10720 = vmatpush1.bf16.msra.mxu0 %v10706
  %10721 = vmatprep.subr.bf16.mxu0 0
  %10722 = vmatpush1.bf16.msra.mxu0 %v10707
  %10723 = vmatprep.subr.bf16.mxu0 0
  %10724 = vmatpush1.bf16.msra.mxu0 0
  %10725 = vmatprep.subr.bf16.mxu0 0
  %10726 = vmatpush1.bf16.msra.mxu0 0
  %10727 = vmatprep.subr.bf16.mxu0 0
  %10728 = vmatpush1.bf16.msra.mxu0 0
  %10729 = vmatprep.subr.bf16.mxu0 0
  %10730 = vmatpush1.bf16.msra.mxu0 0
  %10731 = vmatprep.subr.bf16.mxu0 0
  %10732 = vmatpush1.bf16.msra.mxu0 0
  %10733 = vmatprep.subr.bf16.mxu0 0
  %10734 = vmatpush1.bf16.msra.mxu0 0
  %10735 = vmatprep.subr.bf16.mxu0 0
  %10736 = vmatpush1.bf16.msra.mxu0 0
  %10737 = vmatprep.subr.bf16.mxu0 0
  %10738 = vmatpush1.bf16.msra.mxu0 0
  %10739 = vmatprep.subr.bf16.mxu0 0
  %10740 = vmatpush1.bf16.msra.mxu0 0
  %10741 = vmatprep.subr.bf16.mxu0 0
  %10742 = vmatpush1.bf16.msra.mxu0 0
  %10743 = vmatprep.subr.bf16.mxu0 0
  %10744 = vmatpush1.bf16.msra.mxu0 0
  %10745 = vmatprep.subr.bf16.mxu0 0
  %10746 = vmatpush1.bf16.msra.mxu0 0
  %10747 = vmatprep.mubr.bf16.mxu0 0
  %10748 = vmatmul.mubr.bf16.gmra.mrb[0].mxu0 %v10713
  %v10749 = vpop.f32.mrb[0].mxu0
  %v10750 = vadd.f32 0.0, %v10749
  %v10751 = vpop.f32.mrb[0].mxu0
  %v10752 = vpop.f32.mrb[0].mxu0
  %v10753 = vpop.f32.mrb[0].mxu0
  %10754 = vdwg.mxu0
  %v10763 = vunpack.c.l.b16 %v8302
  %v10764 = vunpack.c.l.b16 %v8303
  %v10765 = vunpack.c.l.b16 %v8304
  %v10766 = vunpack.c.l.b16 %v8305
  %v10767 = vunpack.c.l.b16 %v8306
  %v10768 = vunpack.c.l.b16 %v8307
  %v10769 = vunpack.c.l.b16 %v8308
  %v10770 = vunpack.c.l.b16 %v8309
  %v10771 = vpack.c.b16 %v10764, %v10763
  %v10772 = vpack.c.b16 %v10766, %v10765
  %v10773 = vpack.c.b16 %v10768, %v10767
  %v10774 = vpack.c.b16 %v10770, %v10769
  %v10780 = vsel %vm8902, %v8006, 0
  %10782 = vmatprep.subr.bf16.mxu0 0
  %10783 = vmatpush1.bf16.msra.mxu0 %v10771
  %10784 = vmatprep.subr.bf16.mxu0 0
  %10785 = vmatpush1.bf16.msra.mxu0 %v10772
  %10786 = vmatprep.subr.bf16.mxu0 0
  %10787 = vmatpush1.bf16.msra.mxu0 %v10773
  %10788 = vmatprep.subr.bf16.mxu0 0
  %10789 = vmatpush1.bf16.msra.mxu0 %v10774
  %10790 = vmatprep.subr.bf16.mxu0 0
  %10791 = vmatpush1.bf16.msra.mxu0 0
  %10792 = vmatprep.subr.bf16.mxu0 0
  %10793 = vmatpush1.bf16.msra.mxu0 0
  %10794 = vmatprep.subr.bf16.mxu0 0
  %10795 = vmatpush1.bf16.msra.mxu0 0
  %10796 = vmatprep.subr.bf16.mxu0 0
  %10797 = vmatpush1.bf16.msra.mxu0 0
  %10798 = vmatprep.subr.bf16.mxu0 0
  %10799 = vmatpush1.bf16.msra.mxu0 0
  %10800 = vmatprep.subr.bf16.mxu0 0
  %10801 = vmatpush1.bf16.msra.mxu0 0
  %10802 = vmatprep.subr.bf16.mxu0 0
  %10803 = vmatpush1.bf16.msra.mxu0 0
  %10804 = vmatprep.subr.bf16.mxu0 0
  %10805 = vmatpush1.bf16.msra.mxu0 0
  %10806 = vmatprep.subr.bf16.mxu0 0
  %10807 = vmatpush1.bf16.msra.mxu0 0
  %10808 = vmatprep.subr.bf16.mxu0 0
  %10809 = vmatpush1.bf16.msra.mxu0 0
  %10810 = vmatprep.subr.bf16.mxu0 0
  %10811 = vmatpush1.bf16.msra.mxu0 0
  %10812 = vmatprep.subr.bf16.mxu0 0
  %10813 = vmatpush1.bf16.msra.mxu0 0
  %10814 = vmatprep.mubr.bf16.mxu0 0
  %10815 = vmatmul.mubr.bf16.gmra.mrb[0].mxu0 %v10780
  %v10816 = vpop.f32.mrb[0].mxu0
  %v10817 = vadd.f32 0.0, %v10816
  %v10818 = vpop.f32.mrb[0].mxu0
  %v10819 = vpop.f32.mrb[0].mxu0
  %v10820 = vpop.f32.mrb[0].mxu0
  %10821 = vdwg.mxu0
  %v10830 = vunpack.c.l.b16 %v8310
  %v10831 = vunpack.c.l.b16 %v8311
  %v10832 = vunpack.c.l.b16 %v8312
  %v10833 = vunpack.c.l.b16 %v8313
  %v10834 = vunpack.c.l.b16 %v8314
  %v10835 = vunpack.c.l.b16 %v8315
  %v10836 = vunpack.c.l.b16 %v8316
  %v10837 = vunpack.c.l.b16 %v8317
  %v10838 = vpack.c.b16 %v10831, %v10830
  %v10839 = vpack.c.b16 %v10833, %v10832
  %v10840 = vpack.c.b16 %v10835, %v10834
  %v10841 = vpack.c.b16 %v10837, %v10836
  %v10847 = vsel %vm8902, %v8007, 0
  %10849 = vmatprep.subr.bf16.mxu0 0
  %10850 = vmatpush1.bf16.msra.mxu0 %v10838
  %10851 = vmatprep.subr.bf16.mxu0 0
  %10852 = vmatpush1.bf16.msra.mxu0 %v10839
  %10853 = vmatprep.subr.bf16.mxu0 0
  %10854 = vmatpush1.bf16.msra.mxu0 %v10840
  %10855 = vmatprep.subr.bf16.mxu0 0
  %10856 = vmatpush1.bf16.msra.mxu0 %v10841
  %10857 = vmatprep.subr.bf16.mxu0 0
  %10858 = vmatpush1.bf16.msra.mxu0 0
  %10859 = vmatprep.subr.bf16.mxu0 0
  %10860 = vmatpush1.bf16.msra.mxu0 0
  %10861 = vmatprep.subr.bf16.mxu0 0
  %10862 = vmatpush1.bf16.msra.mxu0 0
  %10863 = vmatprep.subr.bf16.mxu0 0
  %10864 = vmatpush1.bf16.msra.mxu0 0
  %10865 = vmatprep.subr.bf16.mxu0 0
  %10866 = vmatpush1.bf16.msra.mxu0 0
  %10867 = vmatprep.subr.bf16.mxu0 0
  %10868 = vmatpush1.bf16.msra.mxu0 0
  %10869 = vmatprep.subr.bf16.mxu0 0
  %10870 = vmatpush1.bf16.msra.mxu0 0
  %10871 = vmatprep.subr.bf16.mxu0 0
  %10872 = vmatpush1.bf16.msra.mxu0 0
  %10873 = vmatprep.subr.bf16.mxu0 0
  %10874 = vmatpush1.bf16.msra.mxu0 0
  %10875 = vmatprep.subr.bf16.mxu0 0
  %10876 = vmatpush1.bf16.msra.mxu0 0
  %10877 = vmatprep.subr.bf16.mxu0 0
  %10878 = vmatpush1.bf16.msra.mxu0 0
  %10879 = vmatprep.subr.bf16.mxu0 0
  %10880 = vmatpush1.bf16.msra.mxu0 0
  %10881 = vmatprep.mubr.bf16.mxu0 0
  %10882 = vmatmul.mubr.bf16.gmra.mrb[0].mxu0 %v10847
  %v10883 = vpop.f32.mrb[0].mxu0
  %v10884 = vadd.f32 0.0, %v10883
  %v10885 = vpop.f32.mrb[0].mxu0
  %v10886 = vpop.f32.mrb[0].mxu0
  %v10887 = vpop.f32.mrb[0].mxu0
  %10888 = vdwg.mxu0
  %v10897 = vunpack.c.l.b16 %v8318
  %v10898 = vunpack.c.l.b16 %v8319
  %v10899 = vunpack.c.l.b16 %v8320
  %v10900 = vunpack.c.l.b16 %v8321
  %v10901 = vunpack.c.l.b16 %v8322
  %v10902 = vunpack.c.l.b16 %v8323
  %v10903 = vunpack.c.l.b16 %v8324
  %v10904 = vunpack.c.l.b16 %v8325
  %v10905 = vpack.c.b16 %v10898, %v10897
  %v10906 = vpack.c.b16 %v10900, %v10899
  %v10907 = vpack.c.b16 %v10902, %v10901
  %v10908 = vpack.c.b16 %v10904, %v10903
  %v10914 = vsel %vm8902, %v8008, 0
  %10916 = vmatprep.subr.bf16.mxu0 0
  %10917 = vmatpush1.bf16.msra.mxu0 %v10905
  %10918 = vmatprep.subr.bf16.mxu0 0
  %10919 = vmatpush1.bf16.msra.mxu0 %v10906
  %10920 = vmatprep.subr.bf16.mxu0 0
  %10921 = vmatpush1.bf16.msra.mxu0 %v10907
  %10922 = vmatprep.subr.bf16.mxu0 0
  %10923 = vmatpush1.bf16.msra.mxu0 %v10908
  %10924 = vmatprep.subr.bf16.mxu0 0
  %10925 = vmatpush1.bf16.msra.mxu0 0
  %10926 = vmatprep.subr.bf16.mxu0 0
  %10927 = vmatpush1.bf16.msra.mxu0 0
  %10928 = vmatprep.subr.bf16.mxu0 0
  %10929 = vmatpush1.bf16.msra.mxu0 0
  %10930 = vmatprep.subr.bf16.mxu0 0
  %10931 = vmatpush1.bf16.msra.mxu0 0
  %10932 = vmatprep.subr.bf16.mxu0 0
  %10933 = vmatpush1.bf16.msra.mxu0 0
  %10934 = vmatprep.subr.bf16.mxu0 0
  %10935 = vmatpush1.bf16.msra.mxu0 0
  %10936 = vmatprep.subr.bf16.mxu0 0
  %10937 = vmatpush1.bf16.msra.mxu0 0
  %10938 = vmatprep.subr.bf16.mxu0 0
  %10939 = vmatpush1.bf16.msra.mxu0 0
  %10940 = vmatprep.subr.bf16.mxu0 0
  %10941 = vmatpush1.bf16.msra.mxu0 0
  %10942 = vmatprep.subr.bf16.mxu0 0
  %10943 = vmatpush1.bf16.msra.mxu0 0
  %10944 = vmatprep.subr.bf16.mxu0 0
  %10945 = vmatpush1.bf16.msra.mxu0 0
  %10946 = vmatprep.subr.bf16.mxu0 0
  %10947 = vmatpush1.bf16.msra.mxu0 0
  %10948 = vmatprep.mubr.bf16.mxu0 0
  %10949 = vmatmul.mubr.bf16.gmra.mrb[0].mxu0 %v10914
  %v10950 = vpop.f32.mrb[0].mxu0
  %v10951 = vadd.f32 0.0, %v10950
  %v10952 = vpop.f32.mrb[0].mxu0
  %v10953 = vpop.f32.mrb[0].mxu0
  %v10954 = vpop.f32.mrb[0].mxu0
  %10955 = vdwg.mxu0
  %v10964 = vunpack.c.l.b16 %v8326
  %v10965 = vunpack.c.l.b16 %v8327
  %v10966 = vunpack.c.l.b16 %v8328
  %v10967 = vunpack.c.l.b16 %v8329
  %v10968 = vunpack.c.l.b16 %v8330
  %v10969 = vunpack.c.l.b16 %v8331
  %v10970 = vunpack.c.l.b16 %v8332
  %v10971 = vunpack.c.l.b16 %v8333
  %v10972 = vpack.c.b16 %v10965, %v10964
  %v10973 = vpack.c.b16 %v10967, %v10966
  %v10974 = vpack.c.b16 %v10969, %v10968
  %v10975 = vpack.c.b16 %v10971, %v10970
  %v10981 = vsel %vm8902, %v8009, 0
  %10983 = vmatprep.subr.bf16.mxu0 0
  %10984 = vmatpush1.bf16.msra.mxu0 %v10972
  %10985 = vmatprep.subr.bf16.mxu0 0
  %10986 = vmatpush1.bf16.msra.mxu0 %v10973
  %10987 = vmatprep.subr.bf16.mxu0 0
  %10988 = vmatpush1.bf16.msra.mxu0 %v10974
  %10989 = vmatprep.subr.bf16.mxu0 0
  %10990 = vmatpush1.bf16.msra.mxu0 %v10975
  %10991 = vmatprep.subr.bf16.mxu0 0
  %10992 = vmatpush1.bf16.msra.mxu0 0
  %10993 = vmatprep.subr.bf16.mxu0 0
  %10994 = vmatpush1.bf16.msra.mxu0 0
  %10995 = vmatprep.subr.bf16.mxu0 0
  %10996 = vmatpush1.bf16.msra.mxu0 0
  %10997 = vmatprep.subr.bf16.mxu0 0
  %10998 = vmatpush1.bf16.msra.mxu0 0
  %10999 = vmatprep.subr.bf16.mxu0 0
  %11000 = vmatpush1.bf16.msra.mxu0 0
  %11001 = vmatprep.subr.bf16.mxu0 0
  %11002 = vmatpush1.bf16.msra.mxu0 0
  %11003 = vmatprep.subr.bf16.mxu0 0
  %11004 = vmatpush1.bf16.msra.mxu0 0
  %11005 = vmatprep.subr.bf16.mxu0 0
  %11006 = vmatpush1.bf16.msra.mxu0 0
  %11007 = vmatprep.subr.bf16.mxu0 0
  %11008 = vmatpush1.bf16.msra.mxu0 0
  %11009 = vmatprep.subr.bf16.mxu0 0
  %11010 = vmatpush1.bf16.msra.mxu0 0
  %11011 = vmatprep.subr.bf16.mxu0 0
  %11012 = vmatpush1.bf16.msra.mxu0 0
  %11013 = vmatprep.subr.bf16.mxu0 0
  %11014 = vmatpush1.bf16.msra.mxu0 0
  %11015 = vmatprep.mubr.bf16.mxu0 0
  %11016 = vmatmul.mubr.bf16.gmra.mrb[0].mxu0 %v10981
  %v11017 = vpop.f32.mrb[0].mxu0
  %v11018 = vadd.f32 0.0, %v11017
  %v11019 = vpop.f32.mrb[0].mxu0
  %v11020 = vpop.f32.mrb[0].mxu0
  %v11021 = vpop.f32.mrb[0].mxu0
  %11022 = vdwg.mxu0
  %v11031 = vunpack.c.l.b16 %v8334
  %v11032 = vunpack.c.l.b16 %v8335
  %v11033 = vunpack.c.l.b16 %v8336
  %v11034 = vunpack.c.l.b16 %v8337
  %v11035 = vunpack.c.l.b16 %v8338
  %v11036 = vunpack.c.l.b16 %v8339
  %v11037 = vunpack.c.l.b16 %v8340
  %v11038 = vunpack.c.l.b16 %v8341
  %v11039 = vpack.c.b16 %v11032, %v11031
  %v11040 = vpack.c.b16 %v11034, %v11033
  %v11041 = vpack.c.b16 %v11036, %v11035
  %v11042 = vpack.c.b16 %v11038, %v11037
  %v11048 = vsel %vm8902, %v8010, 0
  %11050 = vmatprep.subr.bf16.mxu0 0
  %11051 = vmatpush1.bf16.msra.mxu0 %v11039
  %11052 = vmatprep.subr.bf16.mxu0 0
  %11053 = vmatpush1.bf16.msra.mxu0 %v11040
  %11054 = vmatprep.subr.bf16.mxu0 0
  %11055 = vmatpush1.bf16.msra.mxu0 %v11041
  %11056 = vmatprep.subr.bf16.mxu0 0
  %11057 = vmatpush1.bf16.msra.mxu0 %v11042
  %11058 = vmatprep.subr.bf16.mxu0 0
  %11059 = vmatpush1.bf16.msra.mxu0 0
  %11060 = vmatprep.subr.bf16.mxu0 0
  %11061 = vmatpush1.bf16.msra.mxu0 0
  %11062 = vmatprep.subr.bf16.mxu0 0
  %11063 = vmatpush1.bf16.msra.mxu0 0
  %11064 = vmatprep.subr.bf16.mxu0 0
  %11065 = vmatpush1.bf16.msra.mxu0 0
  %11066 = vmatprep.subr.bf16.mxu0 0
  %11067 = vmatpush1.bf16.msra.mxu0 0
  %11068 = vmatprep.subr.bf16.mxu0 0
  %11069 = vmatpush1.bf16.msra.mxu0 0
  %11070 = vmatprep.subr.bf16.mxu0 0
  %11071 = vmatpush1.bf16.msra.mxu0 0
  %11072 = vmatprep.subr.bf16.mxu0 0
  %11073 = vmatpush1.bf16.msra.mxu0 0
  %11074 = vmatprep.subr.bf16.mxu0 0
  %11075 = vmatpush1.bf16.msra.mxu0 0
  %11076 = vmatprep.subr.bf16.mxu0 0
  %11077 = vmatpush1.bf16.msra.mxu0 0
  %11078 = vmatprep.subr.bf16.mxu0 0
  %11079 = vmatpush1.bf16.msra.mxu0 0
  %11080 = vmatprep.subr.bf16.mxu0 0
  %11081 = vmatpush1.bf16.msra.mxu0 0
  %11082 = vmatprep.mubr.bf16.mxu0 0
  %11083 = vmatmul.mubr.bf16.gmra.mrb[0].mxu0 %v11048
  %v11084 = vpop.f32.mrb[0].mxu0
  %v11085 = vadd.f32 0.0, %v11084
  %v11086 = vpop.f32.mrb[0].mxu0
  %v11087 = vpop.f32.mrb[0].mxu0
  %v11088 = vpop.f32.mrb[0].mxu0
  %11089 = vdwg.mxu0
  %v11098 = vunpack.c.l.b16 %v8342
  %v11099 = vunpack.c.l.b16 %v8343
  %v11100 = vunpack.c.l.b16 %v8344
  %v11101 = vunpack.c.l.b16 %v8345
  %v11102 = vunpack.c.l.b16 %v8346
  %v11103 = vunpack.c.l.b16 %v8347
  %v11104 = vunpack.c.l.b16 %v8348
  %v11105 = vunpack.c.l.b16 %v8349
  %v11106 = vpack.c.b16 %v11099, %v11098
  %v11107 = vpack.c.b16 %v11101, %v11100
  %v11108 = vpack.c.b16 %v11103, %v11102
  %v11109 = vpack.c.b16 %v11105, %v11104
  %v11115 = vsel %vm8902, %v8011, 0
  %11117 = vmatprep.subr.bf16.mxu0 0
  %11118 = vmatpush1.bf16.msra.mxu0 %v11106
  %11119 = vmatprep.subr.bf16.mxu0 0
  %11120 = vmatpush1.bf16.msra.mxu0 %v11107
  %11121 = vmatprep.subr.bf16.mxu0 0
  %11122 = vmatpush1.bf16.msra.mxu0 %v11108
  %11123 = vmatprep.subr.bf16.mxu0 0
  %11124 = vmatpush1.bf16.msra.mxu0 %v11109
  %11125 = vmatprep.subr.bf16.mxu0 0
  %11126 = vmatpush1.bf16.msra.mxu0 0
  %11127 = vmatprep.subr.bf16.mxu0 0
  %11128 = vmatpush1.bf16.msra.mxu0 0
  %11129 = vmatprep.subr.bf16.mxu0 0
  %11130 = vmatpush1.bf16.msra.mxu0 0
  %11131 = vmatprep.subr.bf16.mxu0 0
  %11132 = vmatpush1.bf16.msra.mxu0 0
  %11133 = vmatprep.subr.bf16.mxu0 0
  %11134 = vmatpush1.bf16.msra.mxu0 0
  %11135 = vmatprep.subr.bf16.mxu0 0
  %11136 = vmatpush1.bf16.msra.mxu0 0
  %11137 = vmatprep.subr.bf16.mxu0 0
  %11138 = vmatpush1.bf16.msra.mxu0 0
  %11139 = vmatprep.subr.bf16.mxu0 0
  %11140 = vmatpush1.bf16.msra.mxu0 0
  %11141 = vmatprep.subr.bf16.mxu0 0
  %11142 = vmatpush1.bf16.msra.mxu0 0
  %11143 = vmatprep.subr.bf16.mxu0 0
  %11144 = vmatpush1.bf16.msra.mxu0 0
  %11145 = vmatprep.subr.bf16.mxu0 0
  %11146 = vmatpush1.bf16.msra.mxu0 0
  %11147 = vmatprep.subr.bf16.mxu0 0
  %11148 = vmatpush1.bf16.msra.mxu0 0
  %11149 = vmatprep.mubr.bf16.mxu0 0
  %11150 = vmatmul.mubr.bf16.gmra.mrb[0].mxu0 %v11115
  %v11151 = vpop.f32.mrb[0].mxu0
  %v11152 = vadd.f32 0.0, %v11151
  %v11153 = vpop.f32.mrb[0].mxu0
  %v11154 = vpop.f32.mrb[0].mxu0
  %v11155 = vpop.f32.mrb[0].mxu0
  %11156 = vdwg.mxu0
  %v11165 = vunpack.c.l.b16 %v8350
  %v11166 = vunpack.c.l.b16 %v8351
  %v11167 = vunpack.c.l.b16 %v8352
  %v11168 = vunpack.c.l.b16 %v8353
  %v11169 = vunpack.c.l.b16 %v8354
  %v11170 = vunpack.c.l.b16 %v8355
  %v11171 = vunpack.c.l.b16 %v8356
  %v11172 = vunpack.c.l.b16 %v8357
  %v11173 = vpack.c.b16 %v11166, %v11165
  %v11174 = vpack.c.b16 %v11168, %v11167
  %v11175 = vpack.c.b16 %v11170, %v11169
  %v11176 = vpack.c.b16 %v11172, %v11171
  %v11182 = vsel %vm8902, %v8012, 0
  %11184 = vmatprep.subr.bf16.mxu0 0
  %11185 = vmatpush1.bf16.msra.mxu0 %v11173
  %11186 = vmatprep.subr.bf16.mxu0 0
  %11187 = vmatpush1.bf16.msra.mxu0 %v11174
  %11188 = vmatprep.subr.bf16.mxu0 0
  %11189 = vmatpush1.bf16.msra.mxu0 %v11175
  %11190 = vmatprep.subr.bf16.mxu0 0
  %11191 = vmatpush1.bf16.msra.mxu0 %v11176
  %11192 = vmatprep.subr.bf16.mxu0 0
  %11193 = vmatpush1.bf16.msra.mxu0 0
  %11194 = vmatprep.subr.bf16.mxu0 0
  %11195 = vmatpush1.bf16.msra.mxu0 0
  %11196 = vmatprep.subr.bf16.mxu0 0
  %11197 = vmatpush1.bf16.msra.mxu0 0
  %11198 = vmatprep.subr.bf16.mxu0 0
  %11199 = vmatpush1.bf16.msra.mxu0 0
  %11200 = vmatprep.subr.bf16.mxu0 0
  %11201 = vmatpush1.bf16.msra.mxu0 0
  %11202 = vmatprep.subr.bf16.mxu0 0
  %11203 = vmatpush1.bf16.msra.mxu0 0
  %11204 = vmatprep.subr.bf16.mxu0 0
  %11205 = vmatpush1.bf16.msra.mxu0 0
  %11206 = vmatprep.subr.bf16.mxu0 0
  %11207 = vmatpush1.bf16.msra.mxu0 0
  %11208 = vmatprep.subr.bf16.mxu0 0
  %11209 = vmatpush1.bf16.msra.mxu0 0
  %11210 = vmatprep.subr.bf16.mxu0 0
  %11211 = vmatpush1.bf16.msra.mxu0 0
  %11212 = vmatprep.subr.bf16.mxu0 0
  %11213 = vmatpush1.bf16.msra.mxu0 0
  %11214 = vmatprep.subr.bf16.mxu0 0
  %11215 = vmatpush1.bf16.msra.mxu0 0
  %11216 = vmatprep.mubr.bf16.mxu0 0
  %11217 = vmatmul.mubr.bf16.gmra.mrb[0].mxu0 %v11182
  %v11218 = vpop.f32.mrb[0].mxu0
  %v11219 = vadd.f32 0.0, %v11218
  %v11220 = vpop.f32.mrb[0].mxu0
  %v11221 = vpop.f32.mrb[0].mxu0
  %v11222 = vpop.f32.mrb[0].mxu0
  %11223 = vdwg.mxu0
  %v11232 = vunpack.c.l.b16 %v8358
  %v11233 = vunpack.c.l.b16 %v8359
  %v11234 = vunpack.c.l.b16 %v8360
  %v11235 = vunpack.c.l.b16 %v8361
  %v11236 = vunpack.c.l.b16 %v8362
  %v11237 = vunpack.c.l.b16 %v8363
  %v11238 = vunpack.c.l.b16 %v8364
  %v11239 = vunpack.c.l.b16 %v8365
  %v11240 = vpack.c.b16 %v11233, %v11232
  %v11241 = vpack.c.b16 %v11235, %v11234
  %v11242 = vpack.c.b16 %v11237, %v11236
  %v11243 = vpack.c.b16 %v11239, %v11238
  %v11249 = vsel %vm8902, %v8013, 0
  %11251 = vmatprep.subr.bf16.mxu0 0
  %11252 = vmatpush1.bf16.msra.mxu0 %v11240
  %11253 = vmatprep.subr.bf16.mxu0 0
  %11254 = vmatpush1.bf16.msra.mxu0 %v11241
  %11255 = vmatprep.subr.bf16.mxu0 0
  %11256 = vmatpush1.bf16.msra.mxu0 %v11242
  %11257 = vmatprep.subr.bf16.mxu0 0
  %11258 = vmatpush1.bf16.msra.mxu0 %v11243
  %11259 = vmatprep.subr.bf16.mxu0 0
  %11260 = vmatpush1.bf16.msra.mxu0 0
  %11261 = vmatprep.subr.bf16.mxu0 0
  %11262 = vmatpush1.bf16.msra.mxu0 0
  %11263 = vmatprep.subr.bf16.mxu0 0
  %11264 = vmatpush1.bf16.msra.mxu0 0
  %11265 = vmatprep.subr.bf16.mxu0 0
  %11266 = vmatpush1.bf16.msra.mxu0 0
  %11267 = vmatprep.subr.bf16.mxu0 0
  %11268 = vmatpush1.bf16.msra.mxu0 0
  %11269 = vmatprep.subr.bf16.mxu0 0
  %11270 = vmatpush1.bf16.msra.mxu0 0
  %11271 = vmatprep.subr.bf16.mxu0 0
  %11272 = vmatpush1.bf16.msra.mxu0 0
  %11273 = vmatprep.subr.bf16.mxu0 0
  %11274 = vmatpush1.bf16.msra.mxu0 0
  %11275 = vmatprep.subr.bf16.mxu0 0
  %11276 = vmatpush1.bf16.msra.mxu0 0
  %11277 = vmatprep.subr.bf16.mxu0 0
  %11278 = vmatpush1.bf16.msra.mxu0 0
  %11279 = vmatprep.subr.bf16.mxu0 0
  %11280 = vmatpush1.bf16.msra.mxu0 0
  %11281 = vmatprep.subr.bf16.mxu0 0
  %11282 = vmatpush1.bf16.msra.mxu0 0
  %11283 = vmatprep.mubr.bf16.mxu0 0
  %11284 = vmatmul.mubr.bf16.gmra.mrb[0].mxu0 %v11249
  %v11285 = vpop.f32.mrb[0].mxu0
  %v11286 = vadd.f32 0.0, %v11285
  %v11287 = vpop.f32.mrb[0].mxu0
  %v11288 = vpop.f32.mrb[0].mxu0
  %v11289 = vpop.f32.mrb[0].mxu0
  %11290 = vdwg.mxu0
  %v11299 = vunpack.c.l.b16 %v8366
  %v11300 = vunpack.c.l.b16 %v8367
  %v11301 = vunpack.c.l.b16 %v8368
  %v11302 = vunpack.c.l.b16 %v8369
  %v11303 = vunpack.c.l.b16 %v8370
  %v11304 = vunpack.c.l.b16 %v8371
  %v11305 = vunpack.c.l.b16 %v8372
  %v11306 = vunpack.c.l.b16 %v8373
  %v11307 = vpack.c.b16 %v11300, %v11299
  %v11308 = vpack.c.b16 %v11302, %v11301
  %v11309 = vpack.c.b16 %v11304, %v11303
  %v11310 = vpack.c.b16 %v11306, %v11305
  %v11316 = vsel %vm8902, %v8014, 0
  %11318 = vmatprep.subr.bf16.mxu0 0
  %11319 = vmatpush1.bf16.msra.mxu0 %v11307
  %11320 = vmatprep.subr.bf16.mxu0 0
  %11321 = vmatpush1.bf16.msra.mxu0 %v11308
  %11322 = vmatprep.subr.bf16.mxu0 0
  %11323 = vmatpush1.bf16.msra.mxu0 %v11309
  %11324 = vmatprep.subr.bf16.mxu0 0
  %11325 = vmatpush1.bf16.msra.mxu0 %v11310
  %11326 = vmatprep.subr.bf16.mxu0 0
  %11327 = vmatpush1.bf16.msra.mxu0 0
  %11328 = vmatprep.subr.bf16.mxu0 0
  %11329 = vmatpush1.bf16.msra.mxu0 0
  %11330 = vmatprep.subr.bf16.mxu0 0
  %11331 = vmatpush1.bf16.msra.mxu0 0
  %11332 = vmatprep.subr.bf16.mxu0 0
  %11333 = vmatpush1.bf16.msra.mxu0 0
  %11334 = vmatprep.subr.bf16.mxu0 0
  %11335 = vmatpush1.bf16.msra.mxu0 0
  %11336 = vmatprep.subr.bf16.mxu0 0
  %11337 = vmatpush1.bf16.msra.mxu0 0
  %11338 = vmatprep.subr.bf16.mxu0 0
  %11339 = vmatpush1.bf16.msra.mxu0 0
  %11340 = vmatprep.subr.bf16.mxu0 0
  %11341 = vmatpush1.bf16.msra.mxu0 0
  %11342 = vmatprep.subr.bf16.mxu0 0
  %11343 = vmatpush1.bf16.msra.mxu0 0
  %11344 = vmatprep.subr.bf16.mxu0 0
  %11345 = vmatpush1.bf16.msra.mxu0 0
  %11346 = vmatprep.subr.bf16.mxu0 0
  %11347 = vmatpush1.bf16.msra.mxu0 0
  %11348 = vmatprep.subr.bf16.mxu0 0
  %11349 = vmatpush1.bf16.msra.mxu0 0
  %11350 = vmatprep.mubr.bf16.mxu0 0
  %11351 = vmatmul.mubr.bf16.gmra.mrb[0].mxu0 %v11316
  %v11352 = vpop.f32.mrb[0].mxu0
  %v11353 = vadd.f32 0.0, %v11352
  %v11354 = vpop.f32.mrb[0].mxu0
  %v11355 = vpop.f32.mrb[0].mxu0
  %v11356 = vpop.f32.mrb[0].mxu0
  %11357 = vdwg.mxu0
  %v11366 = vunpack.c.l.b16 %v8374
  %v11367 = vunpack.c.l.b16 %v8375
  %v11368 = vunpack.c.l.b16 %v8376
  %v11369 = vunpack.c.l.b16 %v8377
  %v11370 = vunpack.c.l.b16 %v8378
  %v11371 = vunpack.c.l.b16 %v8379
  %v11372 = vunpack.c.l.b16 %v8380
  %v11373 = vunpack.c.l.b16 %v8381
  %v11374 = vpack.c.b16 %v11367, %v11366
  %v11375 = vpack.c.b16 %v11369, %v11368
  %v11376 = vpack.c.b16 %v11371, %v11370
  %v11377 = vpack.c.b16 %v11373, %v11372
  %v11383 = vsel %vm8902, %v8015, 0
  %11385 = vmatprep.subr.bf16.mxu0 0
  %11386 = vmatpush1.bf16.msra.mxu0 %v11374
  %11387 = vmatprep.subr.bf16.mxu0 0
  %11388 = vmatpush1.bf16.msra.mxu0 %v11375
  %11389 = vmatprep.subr.bf16.mxu0 0
  %11390 = vmatpush1.bf16.msra.mxu0 %v11376
  %11391 = vmatprep.subr.bf16.mxu0 0
  %11392 = vmatpush1.bf16.msra.mxu0 %v11377
  %11393 = vmatprep.subr.bf16.mxu0 0
  %11394 = vmatpush1.bf16.msra.mxu0 0
  %11395 = vmatprep.subr.bf16.mxu0 0
  %11396 = vmatpush1.bf16.msra.mxu0 0
  %11397 = vmatprep.subr.bf16.mxu0 0
  %11398 = vmatpush1.bf16.msra.mxu0 0
  %11399 = vmatprep.subr.bf16.mxu0 0
  %11400 = vmatpush1.bf16.msra.mxu0 0
  %11401 = vmatprep.subr.bf16.mxu0 0
  %11402 = vmatpush1.bf16.msra.mxu0 0
  %11403 = vmatprep.subr.bf16.mxu0 0
  %11404 = vmatpush1.bf16.msra.mxu0 0
  %11405 = vmatprep.subr.bf16.mxu0 0
  %11406 = vmatpush1.bf16.msra.mxu0 0
  %11407 = vmatprep.subr.bf16.mxu0 0
  %11408 = vmatpush1.bf16.msra.mxu0 0
  %11409 = vmatprep.subr.bf16.mxu0 0
  %11410 = vmatpush1.bf16.msra.mxu0 0
  %11411 = vmatprep.subr.bf16.mxu0 0
  %11412 = vmatpush1.bf16.msra.mxu0 0
  %11413 = vmatprep.subr.bf16.mxu0 0
  %11414 = vmatpush1.bf16.msra.mxu0 0
  %11415 = vmatprep.subr.bf16.mxu0 0
  %11416 = vmatpush1.bf16.msra.mxu0 0
  %11417 = vmatprep.mubr.bf16.mxu0 0
  %11418 = vmatmul.mubr.bf16.gmra.mrb[0].mxu0 %v11383
  %v11419 = vpop.f32.mrb[0].mxu0
  %v11420 = vadd.f32 0.0, %v11419
  %v11421 = vpop.f32.mrb[0].mxu0
  %v11422 = vpop.f32.mrb[0].mxu0
  %v11423 = vpop.f32.mrb[0].mxu0
  %11424 = vdwg.mxu0
  %v11433 = vunpack.c.l.b16 %v8382
  %v11434 = vunpack.c.l.b16 %v8383
  %v11435 = vunpack.c.l.b16 %v8384
  %v11436 = vunpack.c.l.b16 %v8385
  %v11437 = vunpack.c.l.b16 %v8386
  %v11438 = vunpack.c.l.b16 %v8387
  %v11439 = vunpack.c.l.b16 %v8388
  %v11440 = vunpack.c.l.b16 %v8389
  %v11441 = vpack.c.b16 %v11434, %v11433
  %v11442 = vpack.c.b16 %v11436, %v11435
  %v11443 = vpack.c.b16 %v11438, %v11437
  %v11444 = vpack.c.b16 %v11440, %v11439
  %v11450 = vsel %vm8902, %v8016, 0
  %11452 = vmatprep.subr.bf16.mxu0 0
  %11453 = vmatpush1.bf16.msra.mxu0 %v11441
  %11454 = vmatprep.subr.bf16.mxu0 0
  %11455 = vmatpush1.bf16.msra.mxu0 %v11442
  %11456 = vmatprep.subr.bf16.mxu0 0
  %11457 = vmatpush1.bf16.msra.mxu0 %v11443
  %11458 = vmatprep.subr.bf16.mxu0 0
  %11459 = vmatpush1.bf16.msra.mxu0 %v11444
  %11460 = vmatprep.subr.bf16.mxu0 0
  %11461 = vmatpush1.bf16.msra.mxu0 0
  %11462 = vmatprep.subr.bf16.mxu0 0
  %11463 = vmatpush1.bf16.msra.mxu0 0
  %11464 = vmatprep.subr.bf16.mxu0 0
  %11465 = vmatpush1.bf16.msra.mxu0 0
  %11466 = vmatprep.subr.bf16.mxu0 0
  %11467 = vmatpush1.bf16.msra.mxu0 0
  %11468 = vmatprep.subr.bf16.mxu0 0
  %11469 = vmatpush1.bf16.msra.mxu0 0
  %11470 = vmatprep.subr.bf16.mxu0 0
  %11471 = vmatpush1.bf16.msra.mxu0 0
  %11472 = vmatprep.subr.bf16.mxu0 0
  %11473 = vmatpush1.bf16.msra.mxu0 0
  %11474 = vmatprep.subr.bf16.mxu0 0
  %11475 = vmatpush1.bf16.msra.mxu0 0
  %11476 = vmatprep.subr.bf16.mxu0 0
  %11477 = vmatpush1.bf16.msra.mxu0 0
  %11478 = vmatprep.subr.bf16.mxu0 0
  %11479 = vmatpush1.bf16.msra.mxu0 0
  %11480 = vmatprep.subr.bf16.mxu0 0
  %11481 = vmatpush1.bf16.msra.mxu0 0
  %11482 = vmatprep.subr.bf16.mxu0 0
  %11483 = vmatpush1.bf16.msra.mxu0 0
  %11484 = vmatprep.mubr.bf16.mxu0 0
  %11485 = vmatmul.mubr.bf16.gmra.mrb[0].mxu0 %v11450
  %v11486 = vpop.f32.mrb[0].mxu0
  %v11487 = vadd.f32 0.0, %v11486
  %v11488 = vpop.f32.mrb[0].mxu0
  %v11489 = vpop.f32.mrb[0].mxu0
  %v11490 = vpop.f32.mrb[0].mxu0
  %11491 = vdwg.mxu0
  %v11500 = vunpack.c.l.b16 %v8390
  %v11501 = vunpack.c.l.b16 %v8391
  %v11502 = vunpack.c.l.b16 %v8392
  %v11503 = vunpack.c.l.b16 %v8393
  %v11504 = vunpack.c.l.b16 %v8394
  %v11505 = vunpack.c.l.b16 %v8395
  %v11506 = vunpack.c.l.b16 %v8396
  %v11507 = vunpack.c.l.b16 %v8397
  %v11508 = vpack.c.b16 %v11501, %v11500
  %v11509 = vpack.c.b16 %v11503, %v11502
  %v11510 = vpack.c.b16 %v11505, %v11504
  %v11511 = vpack.c.b16 %v11507, %v11506
  %v11517 = vsel %vm8902, %v8017, 0
  %11519 = vmatprep.subr.bf16.mxu0 0
  %11520 = vmatpush1.bf16.msra.mxu0 %v11508
  %11521 = vmatprep.subr.bf16.mxu0 0
  %11522 = vmatpush1.bf16.msra.mxu0 %v11509
  %11523 = vmatprep.subr.bf16.mxu0 0
  %11524 = vmatpush1.bf16.msra.mxu0 %v11510
  %11525 = vmatprep.subr.bf16.mxu0 0
  %11526 = vmatpush1.bf16.msra.mxu0 %v11511
  %11527 = vmatprep.subr.bf16.mxu0 0
  %11528 = vmatpush1.bf16.msra.mxu0 0
  %11529 = vmatprep.subr.bf16.mxu0 0
  %11530 = vmatpush1.bf16.msra.mxu0 0
  %11531 = vmatprep.subr.bf16.mxu0 0
  %11532 = vmatpush1.bf16.msra.mxu0 0
  %11533 = vmatprep.subr.bf16.mxu0 0
  %11534 = vmatpush1.bf16.msra.mxu0 0
  %11535 = vmatprep.subr.bf16.mxu0 0
  %11536 = vmatpush1.bf16.msra.mxu0 0
  %11537 = vmatprep.subr.bf16.mxu0 0
  %11538 = vmatpush1.bf16.msra.mxu0 0
  %11539 = vmatprep.subr.bf16.mxu0 0
  %11540 = vmatpush1.bf16.msra.mxu0 0
  %11541 = vmatprep.subr.bf16.mxu0 0
  %11542 = vmatpush1.bf16.msra.mxu0 0
  %11543 = vmatprep.subr.bf16.mxu0 0
  %11544 = vmatpush1.bf16.msra.mxu0 0
  %11545 = vmatprep.subr.bf16.mxu0 0
  %11546 = vmatpush1.bf16.msra.mxu0 0
  %11547 = vmatprep.subr.bf16.mxu0 0
  %11548 = vmatpush1.bf16.msra.mxu0 0
  %11549 = vmatprep.subr.bf16.mxu0 0
  %11550 = vmatpush1.bf16.msra.mxu0 0
  %11551 = vmatprep.mubr.bf16.mxu0 0
  %11552 = vmatmul.mubr.bf16.gmra.mrb[0].mxu0 %v11517
  %v11553 = vpop.f32.mrb[0].mxu0
  %v11554 = vadd.f32 0.0, %v11553
  %v11555 = vpop.f32.mrb[0].mxu0
  %v11556 = vpop.f32.mrb[0].mxu0
  %v11557 = vpop.f32.mrb[0].mxu0
  %11558 = vdwg.mxu0
  %v11567 = vunpack.c.l.b16 %v8398
  %v11568 = vunpack.c.l.b16 %v8399
  %v11569 = vunpack.c.l.b16 %v8400
  %v11570 = vunpack.c.l.b16 %v8401
  %v11571 = vunpack.c.l.b16 %v8402
  %v11572 = vunpack.c.l.b16 %v8403
  %v11573 = vunpack.c.l.b16 %v8404
  %v11574 = vunpack.c.l.b16 %v8405
  %v11575 = vpack.c.b16 %v11568, %v11567
  %v11576 = vpack.c.b16 %v11570, %v11569
  %v11577 = vpack.c.b16 %v11572, %v11571
  %v11578 = vpack.c.b16 %v11574, %v11573
  %v11584 = vsel %vm8902, %v8018, 0
  %11586 = vmatprep.subr.bf16.mxu0 0
  %11587 = vmatpush1.bf16.msra.mxu0 %v11575
  %11588 = vmatprep.subr.bf16.mxu0 0
  %11589 = vmatpush1.bf16.msra.mxu0 %v11576
  %11590 = vmatprep.subr.bf16.mxu0 0
  %11591 = vmatpush1.bf16.msra.mxu0 %v11577
  %11592 = vmatprep.subr.bf16.mxu0 0
  %11593 = vmatpush1.bf16.msra.mxu0 %v11578
  %11594 = vmatprep.subr.bf16.mxu0 0
  %11595 = vmatpush1.bf16.msra.mxu0 0
  %11596 = vmatprep.subr.bf16.mxu0 0
  %11597 = vmatpush1.bf16.msra.mxu0 0
  %11598 = vmatprep.subr.bf16.mxu0 0
  %11599 = vmatpush1.bf16.msra.mxu0 0
  %11600 = vmatprep.subr.bf16.mxu0 0
  %11601 = vmatpush1.bf16.msra.mxu0 0
  %11602 = vmatprep.subr.bf16.mxu0 0
  %11603 = vmatpush1.bf16.msra.mxu0 0
  %11604 = vmatprep.subr.bf16.mxu0 0
  %11605 = vmatpush1.bf16.msra.mxu0 0
  %11606 = vmatprep.subr.bf16.mxu0 0
  %11607 = vmatpush1.bf16.msra.mxu0 0
  %11608 = vmatprep.subr.bf16.mxu0 0
  %11609 = vmatpush1.bf16.msra.mxu0 0
  %11610 = vmatprep.subr.bf16.mxu0 0
  %11611 = vmatpush1.bf16.msra.mxu0 0
  %11612 = vmatprep.subr.bf16.mxu0 0
  %11613 = vmatpush1.bf16.msra.mxu0 0
  %11614 = vmatprep.subr.bf16.mxu0 0
  %11615 = vmatpush1.bf16.msra.mxu0 0
  %11616 = vmatprep.subr.bf16.mxu0 0
  %11617 = vmatpush1.bf16.msra.mxu0 0
  %11618 = vmatprep.mubr.bf16.mxu0 0
  %11619 = vmatmul.mubr.bf16.gmra.mrb[0].mxu0 %v11584
  %v11620 = vpop.f32.mrb[0].mxu0
  %v11621 = vadd.f32 0.0, %v11620
  %v11622 = vpop.f32.mrb[0].mxu0
  %v11623 = vpop.f32.mrb[0].mxu0
  %v11624 = vpop.f32.mrb[0].mxu0
  %11625 = vdwg.mxu0
  %v11634 = vunpack.c.l.b16 %v8406
  %v11635 = vunpack.c.l.b16 %v8407
  %v11636 = vunpack.c.l.b16 %v8408
  %v11637 = vunpack.c.l.b16 %v8409
  %v11638 = vunpack.c.l.b16 %v8410
  %v11639 = vunpack.c.l.b16 %v8411
  %v11640 = vunpack.c.l.b16 %v8412
  %v11641 = vunpack.c.l.b16 %v8413
  %v11642 = vpack.c.b16 %v11635, %v11634
  %v11643 = vpack.c.b16 %v11637, %v11636
  %v11644 = vpack.c.b16 %v11639, %v11638
  %v11645 = vpack.c.b16 %v11641, %v11640
  %v11651 = vsel %vm8902, %v8019, 0
  %11653 = vmatprep.subr.bf16.mxu0 0
  %11654 = vmatpush1.bf16.msra.mxu0 %v11642
  %11655 = vmatprep.subr.bf16.mxu0 0
  %11656 = vmatpush1.bf16.msra.mxu0 %v11643
  %11657 = vmatprep.subr.bf16.mxu0 0
  %11658 = vmatpush1.bf16.msra.mxu0 %v11644
  %11659 = vmatprep.subr.bf16.mxu0 0
  %11660 = vmatpush1.bf16.msra.mxu0 %v11645
  %11661 = vmatprep.subr.bf16.mxu0 0
  %11662 = vmatpush1.bf16.msra.mxu0 0
  %11663 = vmatprep.subr.bf16.mxu0 0
  %11664 = vmatpush1.bf16.msra.mxu0 0
  %11665 = vmatprep.subr.bf16.mxu0 0
  %11666 = vmatpush1.bf16.msra.mxu0 0
  %11667 = vmatprep.subr.bf16.mxu0 0
  %11668 = vmatpush1.bf16.msra.mxu0 0
  %11669 = vmatprep.subr.bf16.mxu0 0
  %11670 = vmatpush1.bf16.msra.mxu0 0
  %11671 = vmatprep.subr.bf16.mxu0 0
  %11672 = vmatpush1.bf16.msra.mxu0 0
  %11673 = vmatprep.subr.bf16.mxu0 0
  %11674 = vmatpush1.bf16.msra.mxu0 0
  %11675 = vmatprep.subr.bf16.mxu0 0
  %11676 = vmatpush1.bf16.msra.mxu0 0
  %11677 = vmatprep.subr.bf16.mxu0 0
  %11678 = vmatpush1.bf16.msra.mxu0 0
  %11679 = vmatprep.subr.bf16.mxu0 0
  %11680 = vmatpush1.bf16.msra.mxu0 0
  %11681 = vmatprep.subr.bf16.mxu0 0
  %11682 = vmatpush1.bf16.msra.mxu0 0
  %11683 = vmatprep.subr.bf16.mxu0 0
  %11684 = vmatpush1.bf16.msra.mxu0 0
  %11685 = vmatprep.mubr.bf16.mxu0 0
  %11686 = vmatmul.mubr.bf16.gmra.mrb[0].mxu0 %v11651
  %v11687 = vpop.f32.mrb[0].mxu0
  %v11688 = vadd.f32 0.0, %v11687
  %v11689 = vpop.f32.mrb[0].mxu0
  %v11690 = vpop.f32.mrb[0].mxu0
  %v11691 = vpop.f32.mrb[0].mxu0
  %11692 = vdwg.mxu0
  %v11701 = vunpack.c.l.b16 %v8414
  %v11702 = vunpack.c.l.b16 %v8415
  %v11703 = vunpack.c.l.b16 %v8416
  %v11704 = vunpack.c.l.b16 %v8417
  %v11705 = vunpack.c.l.b16 %v8418
  %v11706 = vunpack.c.l.b16 %v8419
  %v11707 = vunpack.c.l.b16 %v8420
  %v11708 = vunpack.c.l.b16 %v8421
  %v11709 = vpack.c.b16 %v11702, %v11701
  %v11710 = vpack.c.b16 %v11704, %v11703
  %v11711 = vpack.c.b16 %v11706, %v11705
  %v11712 = vpack.c.b16 %v11708, %v11707
  %v11718 = vsel %vm8902, %v8020, 0
  %11720 = vmatprep.subr.bf16.mxu0 0
  %11721 = vmatpush1.bf16.msra.mxu0 %v11709
  %11722 = vmatprep.subr.bf16.mxu0 0
  %11723 = vmatpush1.bf16.msra.mxu0 %v11710
  %11724 = vmatprep.subr.bf16.mxu0 0
  %11725 = vmatpush1.bf16.msra.mxu0 %v11711
  %11726 = vmatprep.subr.bf16.mxu0 0
  %11727 = vmatpush1.bf16.msra.mxu0 %v11712
  %11728 = vmatprep.subr.bf16.mxu0 0
  %11729 = vmatpush1.bf16.msra.mxu0 0
  %11730 = vmatprep.subr.bf16.mxu0 0
  %11731 = vmatpush1.bf16.msra.mxu0 0
  %11732 = vmatprep.subr.bf16.mxu0 0
  %11733 = vmatpush1.bf16.msra.mxu0 0
  %11734 = vmatprep.subr.bf16.mxu0 0
  %11735 = vmatpush1.bf16.msra.mxu0 0
  %11736 = vmatprep.subr.bf16.mxu0 0
  %11737 = vmatpush1.bf16.msra.mxu0 0
  %11738 = vmatprep.subr.bf16.mxu0 0
  %11739 = vmatpush1.bf16.msra.mxu0 0
  %11740 = vmatprep.subr.bf16.mxu0 0
  %11741 = vmatpush1.bf16.msra.mxu0 0
  %11742 = vmatprep.subr.bf16.mxu0 0
  %11743 = vmatpush1.bf16.msra.mxu0 0
  %11744 = vmatprep.subr.bf16.mxu0 0
  %11745 = vmatpush1.bf16.msra.mxu0 0
  %11746 = vmatprep.subr.bf16.mxu0 0
  %11747 = vmatpush1.bf16.msra.mxu0 0
  %11748 = vmatprep.subr.bf16.mxu0 0
  %11749 = vmatpush1.bf16.msra.mxu0 0
  %11750 = vmatprep.subr.bf16.mxu0 0
  %11751 = vmatpush1.bf16.msra.mxu0 0
  %11752 = vmatprep.mubr.bf16.mxu0 0
  %11753 = vmatmul.mubr.bf16.gmra.mrb[0].mxu0 %v11718
  %v11754 = vpop.f32.mrb[0].mxu0
  %v11755 = vadd.f32 0.0, %v11754
  %v11756 = vpop.f32.mrb[0].mxu0
  %v11757 = vpop.f32.mrb[0].mxu0
  %v11758 = vpop.f32.mrb[0].mxu0
  %11759 = vdwg.mxu0
  %v11768 = vunpack.c.l.b16 %v8422
  %v11769 = vunpack.c.l.b16 %v8423
  %v11770 = vunpack.c.l.b16 %v8424
  %v11771 = vunpack.c.l.b16 %v8425
  %v11772 = vunpack.c.l.b16 %v8426
  %v11773 = vunpack.c.l.b16 %v8427
  %v11774 = vunpack.c.l.b16 %v8428
  %v11775 = vunpack.c.l.b16 %v8429
  %v11776 = vpack.c.b16 %v11769, %v11768
  %v11777 = vpack.c.b16 %v11771, %v11770
  %v11778 = vpack.c.b16 %v11773, %v11772
  %v11779 = vpack.c.b16 %v11775, %v11774
  %v11785 = vsel %vm8902, %v8021, 0
  %11787 = vmatprep.subr.bf16.mxu0 0
  %11788 = vmatpush1.bf16.msra.mxu0 %v11776
  %11789 = vmatprep.subr.bf16.mxu0 0
  %11790 = vmatpush1.bf16.msra.mxu0 %v11777
  %11791 = vmatprep.subr.bf16.mxu0 0
  %11792 = vmatpush1.bf16.msra.mxu0 %v11778
  %11793 = vmatprep.subr.bf16.mxu0 0
  %11794 = vmatpush1.bf16.msra.mxu0 %v11779
  %11795 = vmatprep.subr.bf16.mxu0 0
  %11796 = vmatpush1.bf16.msra.mxu0 0
  %11797 = vmatprep.subr.bf16.mxu0 0
  %11798 = vmatpush1.bf16.msra.mxu0 0
  %11799 = vmatprep.subr.bf16.mxu0 0
  %11800 = vmatpush1.bf16.msra.mxu0 0
  %11801 = vmatprep.subr.bf16.mxu0 0
  %11802 = vmatpush1.bf16.msra.mxu0 0
  %11803 = vmatprep.subr.bf16.mxu0 0
  %11804 = vmatpush1.bf16.msra.mxu0 0
  %11805 = vmatprep.subr.bf16.mxu0 0
  %11806 = vmatpush1.bf16.msra.mxu0 0
  %11807 = vmatprep.subr.bf16.mxu0 0
  %11808 = vmatpush1.bf16.msra.mxu0 0
  %11809 = vmatprep.subr.bf16.mxu0 0
  %11810 = vmatpush1.bf16.msra.mxu0 0
  %11811 = vmatprep.subr.bf16.mxu0 0
  %11812 = vmatpush1.bf16.msra.mxu0 0
  %11813 = vmatprep.subr.bf16.mxu0 0
  %11814 = vmatpush1.bf16.msra.mxu0 0
  %11815 = vmatprep.subr.bf16.mxu0 0
  %11816 = vmatpush1.bf16.msra.mxu0 0
  %11817 = vmatprep.subr.bf16.mxu0 0
  %11818 = vmatpush1.bf16.msra.mxu0 0
  %11819 = vmatprep.mubr.bf16.mxu0 0
  %11820 = vmatmul.mubr.bf16.gmra.mrb[0].mxu0 %v11785
  %v11821 = vpop.f32.mrb[0].mxu0
  %v11822 = vadd.f32 0.0, %v11821
  %v11823 = vpop.f32.mrb[0].mxu0
  %v11824 = vpop.f32.mrb[0].mxu0
  %v11825 = vpop.f32.mrb[0].mxu0
  %11826 = vdwg.mxu0
  %v11835 = vunpack.c.l.b16 %v8430
  %v11836 = vunpack.c.l.b16 %v8431
  %v11837 = vunpack.c.l.b16 %v8432
  %v11838 = vunpack.c.l.b16 %v8433
  %v11839 = vunpack.c.l.b16 %v8434
  %v11840 = vunpack.c.l.b16 %v8435
  %v11841 = vunpack.c.l.b16 %v8436
  %v11842 = vunpack.c.l.b16 %v8437
  %v11843 = vpack.c.b16 %v11836, %v11835
  %v11844 = vpack.c.b16 %v11838, %v11837
  %v11845 = vpack.c.b16 %v11840, %v11839
  %v11846 = vpack.c.b16 %v11842, %v11841
  %v11852 = vsel %vm8902, %v8022, 0
  %11854 = vmatprep.subr.bf16.mxu0 0
  %11855 = vmatpush1.bf16.msra.mxu0 %v11843
  %11856 = vmatprep.subr.bf16.mxu0 0
  %11857 = vmatpush1.bf16.msra.mxu0 %v11844
  %11858 = vmatprep.subr.bf16.mxu0 0
  %11859 = vmatpush1.bf16.msra.mxu0 %v11845
  %11860 = vmatprep.subr.bf16.mxu0 0
  %11861 = vmatpush1.bf16.msra.mxu0 %v11846
  %11862 = vmatprep.subr.bf16.mxu0 0
  %11863 = vmatpush1.bf16.msra.mxu0 0
  %11864 = vmatprep.subr.bf16.mxu0 0
  %11865 = vmatpush1.bf16.msra.mxu0 0
  %11866 = vmatprep.subr.bf16.mxu0 0
  %11867 = vmatpush1.bf16.msra.mxu0 0
  %11868 = vmatprep.subr.bf16.mxu0 0
  %11869 = vmatpush1.bf16.msra.mxu0 0
  %11870 = vmatprep.subr.bf16.mxu0 0
  %11871 = vmatpush1.bf16.msra.mxu0 0
  %11872 = vmatprep.subr.bf16.mxu0 0
  %11873 = vmatpush1.bf16.msra.mxu0 0
  %11874 = vmatprep.subr.bf16.mxu0 0
  %11875 = vmatpush1.bf16.msra.mxu0 0
  %11876 = vmatprep.subr.bf16.mxu0 0
  %11877 = vmatpush1.bf16.msra.mxu0 0
  %11878 = vmatprep.subr.bf16.mxu0 0
  %11879 = vmatpush1.bf16.msra.mxu0 0
  %11880 = vmatprep.subr.bf16.mxu0 0
  %11881 = vmatpush1.bf16.msra.mxu0 0
  %11882 = vmatprep.subr.bf16.mxu0 0
  %11883 = vmatpush1.bf16.msra.mxu0 0
  %11884 = vmatprep.subr.bf16.mxu0 0
  %11885 = vmatpush1.bf16.msra.mxu0 0
  %11886 = vmatprep.mubr.bf16.mxu0 0
  %11887 = vmatmul.mubr.bf16.gmra.mrb[0].mxu0 %v11852
  %v11888 = vpop.f32.mrb[0].mxu0
  %v11889 = vadd.f32 0.0, %v11888
  %v11890 = vpop.f32.mrb[0].mxu0
  %v11891 = vpop.f32.mrb[0].mxu0
  %v11892 = vpop.f32.mrb[0].mxu0
  %11893 = vdwg.mxu0
  %v11902 = vunpack.c.l.b16 %v8438
  %v11903 = vunpack.c.l.b16 %v8439
  %v11904 = vunpack.c.l.b16 %v8440
  %v11905 = vunpack.c.l.b16 %v8441
  %v11906 = vunpack.c.l.b16 %v8442
  %v11907 = vunpack.c.l.b16 %v8443
  %v11908 = vunpack.c.l.b16 %v8444
  %v11909 = vunpack.c.l.b16 %v8445
  %v11910 = vpack.c.b16 %v11903, %v11902
  %v11911 = vpack.c.b16 %v11905, %v11904
  %v11912 = vpack.c.b16 %v11907, %v11906
  %v11913 = vpack.c.b16 %v11909, %v11908
  %v11919 = vsel %vm8902, %v8023, 0
  %11921 = vmatprep.subr.bf16.mxu0 0
  %11922 = vmatpush1.bf16.msra.mxu0 %v11910
  %11923 = vmatprep.subr.bf16.mxu0 0
  %11924 = vmatpush1.bf16.msra.mxu0 %v11911
  %11925 = vmatprep.subr.bf16.mxu0 0
  %11926 = vmatpush1.bf16.msra.mxu0 %v11912
  %11927 = vmatprep.subr.bf16.mxu0 0
  %11928 = vmatpush1.bf16.msra.mxu0 %v11913
  %11929 = vmatprep.subr.bf16.mxu0 0
  %11930 = vmatpush1.bf16.msra.mxu0 0
  %11931 = vmatprep.subr.bf16.mxu0 0
  %11932 = vmatpush1.bf16.msra.mxu0 0
  %11933 = vmatprep.subr.bf16.mxu0 0
  %11934 = vmatpush1.bf16.msra.mxu0 0
  %11935 = vmatprep.subr.bf16.mxu0 0
  %11936 = vmatpush1.bf16.msra.mxu0 0
  %11937 = vmatprep.subr.bf16.mxu0 0
  %11938 = vmatpush1.bf16.msra.mxu0 0
  %11939 = vmatprep.subr.bf16.mxu0 0
  %11940 = vmatpush1.bf16.msra.mxu0 0
  %11941 = vmatprep.subr.bf16.mxu0 0
  %11942 = vmatpush1.bf16.msra.mxu0 0
  %11943 = vmatprep.subr.bf16.mxu0 0
  %11944 = vmatpush1.bf16.msra.mxu0 0
  %11945 = vmatprep.subr.bf16.mxu0 0
  %11946 = vmatpush1.bf16.msra.mxu0 0
  %11947 = vmatprep.subr.bf16.mxu0 0
  %11948 = vmatpush1.bf16.msra.mxu0 0
  %11949 = vmatprep.subr.bf16.mxu0 0
  %11950 = vmatpush1.bf16.msra.mxu0 0
  %11951 = vmatprep.subr.bf16.mxu0 0
  %11952 = vmatpush1.bf16.msra.mxu0 0
  %11953 = vmatprep.mubr.bf16.mxu0 0
  %11954 = vmatmul.mubr.bf16.gmra.mrb[0].mxu0 %v11919
  %v11955 = vpop.f32.mrb[0].mxu0
  %v11956 = vadd.f32 0.0, %v11955
  %v11957 = vpop.f32.mrb[0].mxu0
  %v11958 = vpop.f32.mrb[0].mxu0
  %v11959 = vpop.f32.mrb[0].mxu0
  %11960 = vdwg.mxu0
  %v11969 = vunpack.c.l.b16 %v8446
  %v11970 = vunpack.c.l.b16 %v8447
  %v11971 = vunpack.c.l.b16 %v8448
  %v11972 = vunpack.c.l.b16 %v8449
  %v11973 = vunpack.c.l.b16 %v8450
  %v11974 = vunpack.c.l.b16 %v8451
  %v11975 = vunpack.c.l.b16 %v8452
  %v11976 = vunpack.c.l.b16 %v8453
  %v11977 = vpack.c.b16 %v11970, %v11969
  %v11978 = vpack.c.b16 %v11972, %v11971
  %v11979 = vpack.c.b16 %v11974, %v11973
  %v11980 = vpack.c.b16 %v11976, %v11975
  %v11986 = vsel %vm8902, %v8024, 0
  %11988 = vmatprep.subr.bf16.mxu0 0
  %11989 = vmatpush1.bf16.msra.mxu0 %v11977
  %11990 = vmatprep.subr.bf16.mxu0 0
  %11991 = vmatpush1.bf16.msra.mxu0 %v11978
  %11992 = vmatprep.subr.bf16.mxu0 0
  %11993 = vmatpush1.bf16.msra.mxu0 %v11979
  %11994 = vmatprep.subr.bf16.mxu0 0
  %11995 = vmatpush1.bf16.msra.mxu0 %v11980
  %11996 = vmatprep.subr.bf16.mxu0 0
  %11997 = vmatpush1.bf16.msra.mxu0 0
  %11998 = vmatprep.subr.bf16.mxu0 0
  %11999 = vmatpush1.bf16.msra.mxu0 0
  %12000 = vmatprep.subr.bf16.mxu0 0
  %12001 = vmatpush1.bf16.msra.mxu0 0
  %12002 = vmatprep.subr.bf16.mxu0 0
  %12003 = vmatpush1.bf16.msra.mxu0 0
  %12004 = vmatprep.subr.bf16.mxu0 0
  %12005 = vmatpush1.bf16.msra.mxu0 0
  %12006 = vmatprep.subr.bf16.mxu0 0
  %12007 = vmatpush1.bf16.msra.mxu0 0
  %12008 = vmatprep.subr.bf16.mxu0 0
  %12009 = vmatpush1.bf16.msra.mxu0 0
  %12010 = vmatprep.subr.bf16.mxu0 0
  %12011 = vmatpush1.bf16.msra.mxu0 0
  %12012 = vmatprep.subr.bf16.mxu0 0
  %12013 = vmatpush1.bf16.msra.mxu0 0
  %12014 = vmatprep.subr.bf16.mxu0 0
  %12015 = vmatpush1.bf16.msra.mxu0 0
  %12016 = vmatprep.subr.bf16.mxu0 0
  %12017 = vmatpush1.bf16.msra.mxu0 0
  %12018 = vmatprep.subr.bf16.mxu0 0
  %12019 = vmatpush1.bf16.msra.mxu0 0
  %12020 = vmatprep.mubr.bf16.mxu0 0
  %12021 = vmatmul.mubr.bf16.gmra.mrb[0].mxu0 %v11986
  %v12022 = vpop.f32.mrb[0].mxu0
  %v12023 = vadd.f32 0.0, %v12022
  %v12024 = vpop.f32.mrb[0].mxu0
  %v12025 = vpop.f32.mrb[0].mxu0
  %v12026 = vpop.f32.mrb[0].mxu0
  %12027 = vdwg.mxu0
  %v12036 = vunpack.c.l.b16 %v8454
  %v12037 = vunpack.c.l.b16 %v8455
  %v12038 = vunpack.c.l.b16 %v8456
  %v12039 = vunpack.c.l.b16 %v8457
  %v12040 = vunpack.c.l.b16 %v8458
  %v12041 = vunpack.c.l.b16 %v8459
  %v12042 = vunpack.c.l.b16 %v8460
  %v12043 = vunpack.c.l.b16 %v8461
  %v12044 = vpack.c.b16 %v12037, %v12036
  %v12045 = vpack.c.b16 %v12039, %v12038
  %v12046 = vpack.c.b16 %v12041, %v12040
  %v12047 = vpack.c.b16 %v12043, %v12042
  %v12053 = vsel %vm8902, %v8025, 0
  %12055 = vmatprep.subr.bf16.mxu0 0
  %12056 = vmatpush1.bf16.msra.mxu0 %v12044
  %12057 = vmatprep.subr.bf16.mxu0 0
  %12058 = vmatpush1.bf16.msra.mxu0 %v12045
  %12059 = vmatprep.subr.bf16.mxu0 0
  %12060 = vmatpush1.bf16.msra.mxu0 %v12046
  %12061 = vmatprep.subr.bf16.mxu0 0
  %12062 = vmatpush1.bf16.msra.mxu0 %v12047
  %12063 = vmatprep.subr.bf16.mxu0 0
  %12064 = vmatpush1.bf16.msra.mxu0 0
  %12065 = vmatprep.subr.bf16.mxu0 0
  %12066 = vmatpush1.bf16.msra.mxu0 0
  %12067 = vmatprep.subr.bf16.mxu0 0
  %12068 = vmatpush1.bf16.msra.mxu0 0
  %12069 = vmatprep.subr.bf16.mxu0 0
  %12070 = vmatpush1.bf16.msra.mxu0 0
  %12071 = vmatprep.subr.bf16.mxu0 0
  %12072 = vmatpush1.bf16.msra.mxu0 0
  %12073 = vmatprep.subr.bf16.mxu0 0
  %12074 = vmatpush1.bf16.msra.mxu0 0
  %12075 = vmatprep.subr.bf16.mxu0 0
  %12076 = vmatpush1.bf16.msra.mxu0 0
  %12077 = vmatprep.subr.bf16.mxu0 0
  %12078 = vmatpush1.bf16.msra.mxu0 0
  %12079 = vmatprep.subr.bf16.mxu0 0
  %12080 = vmatpush1.bf16.msra.mxu0 0
  %12081 = vmatprep.subr.bf16.mxu0 0
  %12082 = vmatpush1.bf16.msra.mxu0 0
  %12083 = vmatprep.subr.bf16.mxu0 0
  %12084 = vmatpush1.bf16.msra.mxu0 0
  %12085 = vmatprep.subr.bf16.mxu0 0
  %12086 = vmatpush1.bf16.msra.mxu0 0
  %12087 = vmatprep.mubr.bf16.mxu0 0
  %12088 = vmatmul.mubr.bf16.gmra.mrb[0].mxu0 %v12053
  %v12089 = vpop.f32.mrb[0].mxu0
  %v12090 = vadd.f32 0.0, %v12089
  %v12091 = vpop.f32.mrb[0].mxu0
  %v12092 = vpop.f32.mrb[0].mxu0
  %v12093 = vpop.f32.mrb[0].mxu0
  %12094 = vdwg.mxu0
  %v12103 = vunpack.c.l.b16 %v8462
  %v12104 = vunpack.c.l.b16 %v8463
  %v12105 = vunpack.c.l.b16 %v8464
  %v12106 = vunpack.c.l.b16 %v8465
  %v12107 = vunpack.c.l.b16 %v8466
  %v12108 = vunpack.c.l.b16 %v8467
  %v12109 = vunpack.c.l.b16 %v8468
  %v12110 = vunpack.c.l.b16 %v8469
  %v12111 = vpack.c.b16 %v12104, %v12103
  %v12112 = vpack.c.b16 %v12106, %v12105
  %v12113 = vpack.c.b16 %v12108, %v12107
  %v12114 = vpack.c.b16 %v12110, %v12109
  %v12120 = vsel %vm8902, %v8026, 0
  %12122 = vmatprep.subr.bf16.mxu0 0
  %12123 = vmatpush1.bf16.msra.mxu0 %v12111
  %12124 = vmatprep.subr.bf16.mxu0 0
  %12125 = vmatpush1.bf16.msra.mxu0 %v12112
  %12126 = vmatprep.subr.bf16.mxu0 0
  %12127 = vmatpush1.bf16.msra.mxu0 %v12113
  %12128 = vmatprep.subr.bf16.mxu0 0
  %12129 = vmatpush1.bf16.msra.mxu0 %v12114
  %12130 = vmatprep.subr.bf16.mxu0 0
  %12131 = vmatpush1.bf16.msra.mxu0 0
  %12132 = vmatprep.subr.bf16.mxu0 0
  %12133 = vmatpush1.bf16.msra.mxu0 0
  %12134 = vmatprep.subr.bf16.mxu0 0
  %12135 = vmatpush1.bf16.msra.mxu0 0
  %12136 = vmatprep.subr.bf16.mxu0 0
  %12137 = vmatpush1.bf16.msra.mxu0 0
  %12138 = vmatprep.subr.bf16.mxu0 0
  %12139 = vmatpush1.bf16.msra.mxu0 0
  %12140 = vmatprep.subr.bf16.mxu0 0
  %12141 = vmatpush1.bf16.msra.mxu0 0
  %12142 = vmatprep.subr.bf16.mxu0 0
  %12143 = vmatpush1.bf16.msra.mxu0 0
  %12144 = vmatprep.subr.bf16.mxu0 0
  %12145 = vmatpush1.bf16.msra.mxu0 0
  %12146 = vmatprep.subr.bf16.mxu0 0
  %12147 = vmatpush1.bf16.msra.mxu0 0
  %12148 = vmatprep.subr.bf16.mxu0 0
  %12149 = vmatpush1.bf16.msra.mxu0 0
  %12150 = vmatprep.subr.bf16.mxu0 0
  %12151 = vmatpush1.bf16.msra.mxu0 0
  %12152 = vmatprep.subr.bf16.mxu0 0
  %12153 = vmatpush1.bf16.msra.mxu0 0
  %12154 = vmatprep.mubr.bf16.mxu0 0
  %12155 = vmatmul.mubr.bf16.gmra.mrb[0].mxu0 %v12120
  %v12156 = vpop.f32.mrb[0].mxu0
  %v12157 = vadd.f32 0.0, %v12156
  %v12158 = vpop.f32.mrb[0].mxu0
  %v12159 = vpop.f32.mrb[0].mxu0
  %v12160 = vpop.f32.mrb[0].mxu0
  %12161 = vdwg.mxu0
  %v12170 = vunpack.c.l.b16 %v8470
  %v12171 = vunpack.c.l.b16 %v8471
  %v12172 = vunpack.c.l.b16 %v8472
  %v12173 = vunpack.c.l.b16 %v8473
  %v12174 = vunpack.c.l.b16 %v8474
  %v12175 = vunpack.c.l.b16 %v8475
  %v12176 = vunpack.c.l.b16 %v8476
  %v12177 = vunpack.c.l.b16 %v8477
  %v12178 = vpack.c.b16 %v12171, %v12170
  %v12179 = vpack.c.b16 %v12173, %v12172
  %v12180 = vpack.c.b16 %v12175, %v12174
  %v12181 = vpack.c.b16 %v12177, %v12176
  %v12187 = vsel %vm8902, %v8027, 0
  %12189 = vmatprep.subr.bf16.mxu0 0
  %12190 = vmatpush1.bf16.msra.mxu0 %v12178
  %12191 = vmatprep.subr.bf16.mxu0 0
  %12192 = vmatpush1.bf16.msra.mxu0 %v12179
  %12193 = vmatprep.subr.bf16.mxu0 0
  %12194 = vmatpush1.bf16.msra.mxu0 %v12180
  %12195 = vmatprep.subr.bf16.mxu0 0
  %12196 = vmatpush1.bf16.msra.mxu0 %v12181
  %12197 = vmatprep.subr.bf16.mxu0 0
  %12198 = vmatpush1.bf16.msra.mxu0 0
  %12199 = vmatprep.subr.bf16.mxu0 0
  %12200 = vmatpush1.bf16.msra.mxu0 0
  %12201 = vmatprep.subr.bf16.mxu0 0
  %12202 = vmatpush1.bf16.msra.mxu0 0
  %12203 = vmatprep.subr.bf16.mxu0 0
  %12204 = vmatpush1.bf16.msra.mxu0 0
  %12205 = vmatprep.subr.bf16.mxu0 0
  %12206 = vmatpush1.bf16.msra.mxu0 0
  %12207 = vmatprep.subr.bf16.mxu0 0
  %12208 = vmatpush1.bf16.msra.mxu0 0
  %12209 = vmatprep.subr.bf16.mxu0 0
  %12210 = vmatpush1.bf16.msra.mxu0 0
  %12211 = vmatprep.subr.bf16.mxu0 0
  %12212 = vmatpush1.bf16.msra.mxu0 0
  %12213 = vmatprep.subr.bf16.mxu0 0
  %12214 = vmatpush1.bf16.msra.mxu0 0
  %12215 = vmatprep.subr.bf16.mxu0 0
  %12216 = vmatpush1.bf16.msra.mxu0 0
  %12217 = vmatprep.subr.bf16.mxu0 0
  %12218 = vmatpush1.bf16.msra.mxu0 0
  %12219 = vmatprep.subr.bf16.mxu0 0
  %12220 = vmatpush1.bf16.msra.mxu0 0
  %12221 = vmatprep.mubr.bf16.mxu0 0
  %12222 = vmatmul.mubr.bf16.gmra.mrb[0].mxu0 %v12187
  %v12223 = vpop.f32.mrb[0].mxu0
  %v12224 = vadd.f32 0.0, %v12223
  %v12225 = vpop.f32.mrb[0].mxu0
  %v12226 = vpop.f32.mrb[0].mxu0
  %v12227 = vpop.f32.mrb[0].mxu0
  %12228 = vdwg.mxu0
  %v12237 = vunpack.c.l.b16 %v8478
  %v12238 = vunpack.c.l.b16 %v8479
  %v12239 = vunpack.c.l.b16 %v8480
  %v12240 = vunpack.c.l.b16 %v8481
  %v12241 = vunpack.c.l.b16 %v8482
  %v12242 = vunpack.c.l.b16 %v8483
  %v12243 = vunpack.c.l.b16 %v8484
  %v12244 = vunpack.c.l.b16 %v8485
  %v12245 = vpack.c.b16 %v12238, %v12237
  %v12246 = vpack.c.b16 %v12240, %v12239
  %v12247 = vpack.c.b16 %v12242, %v12241
  %v12248 = vpack.c.b16 %v12244, %v12243
  %v12254 = vsel %vm8902, %v8028, 0
  %12256 = vmatprep.subr.bf16.mxu0 0
  %12257 = vmatpush1.bf16.msra.mxu0 %v12245
  %12258 = vmatprep.subr.bf16.mxu0 0
  %12259 = vmatpush1.bf16.msra.mxu0 %v12246
  %12260 = vmatprep.subr.bf16.mxu0 0
  %12261 = vmatpush1.bf16.msra.mxu0 %v12247
  %12262 = vmatprep.subr.bf16.mxu0 0
  %12263 = vmatpush1.bf16.msra.mxu0 %v12248
  %12264 = vmatprep.subr.bf16.mxu0 0
  %12265 = vmatpush1.bf16.msra.mxu0 0
  %12266 = vmatprep.subr.bf16.mxu0 0
  %12267 = vmatpush1.bf16.msra.mxu0 0
  %12268 = vmatprep.subr.bf16.mxu0 0
  %12269 = vmatpush1.bf16.msra.mxu0 0
  %12270 = vmatprep.subr.bf16.mxu0 0
  %12271 = vmatpush1.bf16.msra.mxu0 0
  %12272 = vmatprep.subr.bf16.mxu0 0
  %12273 = vmatpush1.bf16.msra.mxu0 0
  %12274 = vmatprep.subr.bf16.mxu0 0
  %12275 = vmatpush1.bf16.msra.mxu0 0
  %12276 = vmatprep.subr.bf16.mxu0 0
  %12277 = vmatpush1.bf16.msra.mxu0 0
  %12278 = vmatprep.subr.bf16.mxu0 0
  %12279 = vmatpush1.bf16.msra.mxu0 0
  %12280 = vmatprep.subr.bf16.mxu0 0
  %12281 = vmatpush1.bf16.msra.mxu0 0
  %12282 = vmatprep.subr.bf16.mxu0 0
  %12283 = vmatpush1.bf16.msra.mxu0 0
  %12284 = vmatprep.subr.bf16.mxu0 0
  %12285 = vmatpush1.bf16.msra.mxu0 0
  %12286 = vmatprep.subr.bf16.mxu0 0
  %12287 = vmatpush1.bf16.msra.mxu0 0
  %12288 = vmatprep.mubr.bf16.mxu0 0
  %12289 = vmatmul.mubr.bf16.gmra.mrb[0].mxu0 %v12254
  %v12290 = vpop.f32.mrb[0].mxu0
  %v12291 = vadd.f32 0.0, %v12290
  %v12292 = vpop.f32.mrb[0].mxu0
  %v12293 = vpop.f32.mrb[0].mxu0
  %v12294 = vpop.f32.mrb[0].mxu0
  %12295 = vdwg.mxu0
  %v12304 = vunpack.c.l.b16 %v8486
  %v12305 = vunpack.c.l.b16 %v8487
  %v12306 = vunpack.c.l.b16 %v8488
  %v12307 = vunpack.c.l.b16 %v8489
  %v12308 = vunpack.c.l.b16 %v8490
  %v12309 = vunpack.c.l.b16 %v8491
  %v12310 = vunpack.c.l.b16 %v8492
  %v12311 = vunpack.c.l.b16 %v8493
  %v12312 = vpack.c.b16 %v12305, %v12304
  %v12313 = vpack.c.b16 %v12307, %v12306
  %v12314 = vpack.c.b16 %v12309, %v12308
  %v12315 = vpack.c.b16 %v12311, %v12310
  %v12321 = vsel %vm8902, %v8029, 0
  %12323 = vmatprep.subr.bf16.mxu0 0
  %12324 = vmatpush1.bf16.msra.mxu0 %v12312
  %12325 = vmatprep.subr.bf16.mxu0 0
  %12326 = vmatpush1.bf16.msra.mxu0 %v12313
  %12327 = vmatprep.subr.bf16.mxu0 0
  %12328 = vmatpush1.bf16.msra.mxu0 %v12314
  %12329 = vmatprep.subr.bf16.mxu0 0
  %12330 = vmatpush1.bf16.msra.mxu0 %v12315
  %12331 = vmatprep.subr.bf16.mxu0 0
  %12332 = vmatpush1.bf16.msra.mxu0 0
  %12333 = vmatprep.subr.bf16.mxu0 0
  %12334 = vmatpush1.bf16.msra.mxu0 0
  %12335 = vmatprep.subr.bf16.mxu0 0
  %12336 = vmatpush1.bf16.msra.mxu0 0
  %12337 = vmatprep.subr.bf16.mxu0 0
  %12338 = vmatpush1.bf16.msra.mxu0 0
  %12339 = vmatprep.subr.bf16.mxu0 0
  %12340 = vmatpush1.bf16.msra.mxu0 0
  %12341 = vmatprep.subr.bf16.mxu0 0
  %12342 = vmatpush1.bf16.msra.mxu0 0
  %12343 = vmatprep.subr.bf16.mxu0 0
  %12344 = vmatpush1.bf16.msra.mxu0 0
  %12345 = vmatprep.subr.bf16.mxu0 0
  %12346 = vmatpush1.bf16.msra.mxu0 0
  %12347 = vmatprep.subr.bf16.mxu0 0
  %12348 = vmatpush1.bf16.msra.mxu0 0
  %12349 = vmatprep.subr.bf16.mxu0 0
  %12350 = vmatpush1.bf16.msra.mxu0 0
  %12351 = vmatprep.subr.bf16.mxu0 0
  %12352 = vmatpush1.bf16.msra.mxu0 0
  %12353 = vmatprep.subr.bf16.mxu0 0
  %12354 = vmatpush1.bf16.msra.mxu0 0
  %12355 = vmatprep.mubr.bf16.mxu0 0
  %12356 = vmatmul.mubr.bf16.gmra.mrb[0].mxu0 %v12321
  %v12357 = vpop.f32.mrb[0].mxu0
  %v12358 = vadd.f32 0.0, %v12357
  %v12359 = vpop.f32.mrb[0].mxu0
  %v12360 = vpop.f32.mrb[0].mxu0
  %v12361 = vpop.f32.mrb[0].mxu0
  %12362 = vdwg.mxu0
  %v12371 = vunpack.c.l.b16 %v8494
  %v12372 = vunpack.c.l.b16 %v8495
  %v12373 = vunpack.c.l.b16 %v8496
  %v12374 = vunpack.c.l.b16 %v8497
  %v12375 = vunpack.c.l.b16 %v8498
  %v12376 = vunpack.c.l.b16 %v8499
  %v12377 = vunpack.c.l.b16 %v8500
  %v12378 = vunpack.c.l.b16 %v8501
  %v12379 = vpack.c.b16 %v12372, %v12371
  %v12380 = vpack.c.b16 %v12374, %v12373
  %v12381 = vpack.c.b16 %v12376, %v12375
  %v12382 = vpack.c.b16 %v12378, %v12377
  %v12388 = vsel %vm8902, %v8030, 0
  %12390 = vmatprep.subr.bf16.mxu0 0
  %12391 = vmatpush1.bf16.msra.mxu0 %v12379
  %12392 = vmatprep.subr.bf16.mxu0 0
  %12393 = vmatpush1.bf16.msra.mxu0 %v12380
  %12394 = vmatprep.subr.bf16.mxu0 0
  %12395 = vmatpush1.bf16.msra.mxu0 %v12381
  %12396 = vmatprep.subr.bf16.mxu0 0
  %12397 = vmatpush1.bf16.msra.mxu0 %v12382
  %12398 = vmatprep.subr.bf16.mxu0 0
  %12399 = vmatpush1.bf16.msra.mxu0 0
  %12400 = vmatprep.subr.bf16.mxu0 0
  %12401 = vmatpush1.bf16.msra.mxu0 0
  %12402 = vmatprep.subr.bf16.mxu0 0
  %12403 = vmatpush1.bf16.msra.mxu0 0
  %12404 = vmatprep.subr.bf16.mxu0 0
  %12405 = vmatpush1.bf16.msra.mxu0 0
  %12406 = vmatprep.subr.bf16.mxu0 0
  %12407 = vmatpush1.bf16.msra.mxu0 0
  %12408 = vmatprep.subr.bf16.mxu0 0
  %12409 = vmatpush1.bf16.msra.mxu0 0
  %12410 = vmatprep.subr.bf16.mxu0 0
  %12411 = vmatpush1.bf16.msra.mxu0 0
  %12412 = vmatprep.subr.bf16.mxu0 0
  %12413 = vmatpush1.bf16.msra.mxu0 0
  %12414 = vmatprep.subr.bf16.mxu0 0
  %12415 = vmatpush1.bf16.msra.mxu0 0
  %12416 = vmatprep.subr.bf16.mxu0 0
  %12417 = vmatpush1.bf16.msra.mxu0 0
  %12418 = vmatprep.subr.bf16.mxu0 0
  %12419 = vmatpush1.bf16.msra.mxu0 0
  %12420 = vmatprep.subr.bf16.mxu0 0
  %12421 = vmatpush1.bf16.msra.mxu0 0
  %12422 = vmatprep.mubr.bf16.mxu0 0
  %12423 = vmatmul.mubr.bf16.gmra.mrb[0].mxu0 %v12388
  %v12424 = vpop.f32.mrb[0].mxu0
  %v12425 = vadd.f32 0.0, %v12424
  %v12426 = vpop.f32.mrb[0].mxu0
  %v12427 = vpop.f32.mrb[0].mxu0
  %v12428 = vpop.f32.mrb[0].mxu0
  %12429 = vdwg.mxu0
  %v12438 = vunpack.c.l.b16 %v8502
  %v12439 = vunpack.c.l.b16 %v8503
  %v12440 = vunpack.c.l.b16 %v8504
  %v12441 = vunpack.c.l.b16 %v8505
  %v12442 = vunpack.c.l.b16 %v8506
  %v12443 = vunpack.c.l.b16 %v8507
  %v12444 = vunpack.c.l.b16 %v8508
  %v12445 = vunpack.c.l.b16 %v8509
  %v12446 = vpack.c.b16 %v12439, %v12438
  %v12447 = vpack.c.b16 %v12441, %v12440
  %v12448 = vpack.c.b16 %v12443, %v12442
  %v12449 = vpack.c.b16 %v12445, %v12444
  %v12455 = vsel %vm8902, %v8031, 0
  %12457 = vmatprep.subr.bf16.mxu0 0
  %12458 = vmatpush1.bf16.msra.mxu0 %v12446
  %12459 = vmatprep.subr.bf16.mxu0 0
  %12460 = vmatpush1.bf16.msra.mxu0 %v12447
  %12461 = vmatprep.subr.bf16.mxu0 0
  %12462 = vmatpush1.bf16.msra.mxu0 %v12448
  %12463 = vmatprep.subr.bf16.mxu0 0
  %12464 = vmatpush1.bf16.msra.mxu0 %v12449
  %12465 = vmatprep.subr.bf16.mxu0 0
  %12466 = vmatpush1.bf16.msra.mxu0 0
  %12467 = vmatprep.subr.bf16.mxu0 0
  %12468 = vmatpush1.bf16.msra.mxu0 0
  %12469 = vmatprep.subr.bf16.mxu0 0
  %12470 = vmatpush1.bf16.msra.mxu0 0
  %12471 = vmatprep.subr.bf16.mxu0 0
  %12472 = vmatpush1.bf16.msra.mxu0 0
  %12473 = vmatprep.subr.bf16.mxu0 0
  %12474 = vmatpush1.bf16.msra.mxu0 0
  %12475 = vmatprep.subr.bf16.mxu0 0
  %12476 = vmatpush1.bf16.msra.mxu0 0
  %12477 = vmatprep.subr.bf16.mxu0 0
  %12478 = vmatpush1.bf16.msra.mxu0 0
  %12479 = vmatprep.subr.bf16.mxu0 0
  %12480 = vmatpush1.bf16.msra.mxu0 0
  %12481 = vmatprep.subr.bf16.mxu0 0
  %12482 = vmatpush1.bf16.msra.mxu0 0
  %12483 = vmatprep.subr.bf16.mxu0 0
  %12484 = vmatpush1.bf16.msra.mxu0 0
  %12485 = vmatprep.subr.bf16.mxu0 0
  %12486 = vmatpush1.bf16.msra.mxu0 0
  %12487 = vmatprep.subr.bf16.mxu0 0
  %12488 = vmatpush1.bf16.msra.mxu0 0
  %12489 = vmatprep.mubr.bf16.mxu0 0
  %12490 = vmatmul.mubr.bf16.gmra.mrb[0].mxu0 %v12455
  %v12491 = vpop.f32.mrb[0].mxu0
  %v12492 = vadd.f32 0.0, %v12491
  %v12493 = vpop.f32.mrb[0].mxu0
  %v12494 = vpop.f32.mrb[0].mxu0
  %v12495 = vpop.f32.mrb[0].mxu0
  %12496 = vdwg.mxu0
  %v12505 = vunpack.c.l.b16 %v8510
  %v12506 = vunpack.c.l.b16 %v8511
  %v12507 = vunpack.c.l.b16 %v8512
  %v12508 = vunpack.c.l.b16 %v8513
  %v12509 = vunpack.c.l.b16 %v8514
  %v12510 = vunpack.c.l.b16 %v8515
  %v12511 = vunpack.c.l.b16 %v8516
  %v12512 = vunpack.c.l.b16 %v8517
  %v12513 = vpack.c.b16 %v12506, %v12505
  %v12514 = vpack.c.b16 %v12508, %v12507
  %v12515 = vpack.c.b16 %v12510, %v12509
  %v12516 = vpack.c.b16 %v12512, %v12511
  %v12522 = vsel %vm8902, %v8032, 0
  %12524 = vmatprep.subr.bf16.mxu0 0
  %12525 = vmatpush1.bf16.msra.mxu0 %v12513
  %12526 = vmatprep.subr.bf16.mxu0 0
  %12527 = vmatpush1.bf16.msra.mxu0 %v12514
  %12528 = vmatprep.subr.bf16.mxu0 0
  %12529 = vmatpush1.bf16.msra.mxu0 %v12515
  %12530 = vmatprep.subr.bf16.mxu0 0
  %12531 = vmatpush1.bf16.msra.mxu0 %v12516
  %12532 = vmatprep.subr.bf16.mxu0 0
  %12533 = vmatpush1.bf16.msra.mxu0 0
  %12534 = vmatprep.subr.bf16.mxu0 0
  %12535 = vmatpush1.bf16.msra.mxu0 0
  %12536 = vmatprep.subr.bf16.mxu0 0
  %12537 = vmatpush1.bf16.msra.mxu0 0
  %12538 = vmatprep.subr.bf16.mxu0 0
  %12539 = vmatpush1.bf16.msra.mxu0 0
  %12540 = vmatprep.subr.bf16.mxu0 0
  %12541 = vmatpush1.bf16.msra.mxu0 0
  %12542 = vmatprep.subr.bf16.mxu0 0
  %12543 = vmatpush1.bf16.msra.mxu0 0
  %12544 = vmatprep.subr.bf16.mxu0 0
  %12545 = vmatpush1.bf16.msra.mxu0 0
  %12546 = vmatprep.subr.bf16.mxu0 0
  %12547 = vmatpush1.bf16.msra.mxu0 0
  %12548 = vmatprep.subr.bf16.mxu0 0
  %12549 = vmatpush1.bf16.msra.mxu0 0
  %12550 = vmatprep.subr.bf16.mxu0 0
  %12551 = vmatpush1.bf16.msra.mxu0 0
  %12552 = vmatprep.subr.bf16.mxu0 0
  %12553 = vmatpush1.bf16.msra.mxu0 0
  %12554 = vmatprep.subr.bf16.mxu0 0
  %12555 = vmatpush1.bf16.msra.mxu0 0
  %12556 = vmatprep.mubr.bf16.mxu0 0
  %12557 = vmatmul.mubr.bf16.gmra.mrb[0].mxu0 %v12522
  %v12558 = vpop.f32.mrb[0].mxu0
  %v12559 = vadd.f32 0.0, %v12558
  %v12560 = vpop.f32.mrb[0].mxu0
  %v12561 = vpop.f32.mrb[0].mxu0
  %v12562 = vpop.f32.mrb[0].mxu0
  %12563 = vdwg.mxu0
  %v12572 = vunpack.c.l.b16 %v8518
  %v12573 = vunpack.c.l.b16 %v8519
  %v12574 = vunpack.c.l.b16 %v8520
  %v12575 = vunpack.c.l.b16 %v8521
  %v12576 = vunpack.c.l.b16 %v8522
  %v12577 = vunpack.c.l.b16 %v8523
  %v12578 = vunpack.c.l.b16 %v8524
  %v12579 = vunpack.c.l.b16 %v8525
  %v12580 = vpack.c.b16 %v12573, %v12572
  %v12581 = vpack.c.b16 %v12575, %v12574
  %v12582 = vpack.c.b16 %v12577, %v12576
  %v12583 = vpack.c.b16 %v12579, %v12578
  %v12589 = vsel %vm8902, %v8033, 0
  %12591 = vmatprep.subr.bf16.mxu0 0
  %12592 = vmatpush1.bf16.msra.mxu0 %v12580
  %12593 = vmatprep.subr.bf16.mxu0 0
  %12594 = vmatpush1.bf16.msra.mxu0 %v12581
  %12595 = vmatprep.subr.bf16.mxu0 0
  %12596 = vmatpush1.bf16.msra.mxu0 %v12582
  %12597 = vmatprep.subr.bf16.mxu0 0
  %12598 = vmatpush1.bf16.msra.mxu0 %v12583
  %12599 = vmatprep.subr.bf16.mxu0 0
  %12600 = vmatpush1.bf16.msra.mxu0 0
  %12601 = vmatprep.subr.bf16.mxu0 0
  %12602 = vmatpush1.bf16.msra.mxu0 0
  %12603 = vmatprep.subr.bf16.mxu0 0
  %12604 = vmatpush1.bf16.msra.mxu0 0
  %12605 = vmatprep.subr.bf16.mxu0 0
  %12606 = vmatpush1.bf16.msra.mxu0 0
  %12607 = vmatprep.subr.bf16.mxu0 0
  %12608 = vmatpush1.bf16.msra.mxu0 0
  %12609 = vmatprep.subr.bf16.mxu0 0
  %12610 = vmatpush1.bf16.msra.mxu0 0
  %12611 = vmatprep.subr.bf16.mxu0 0
  %12612 = vmatpush1.bf16.msra.mxu0 0
  %12613 = vmatprep.subr.bf16.mxu0 0
  %12614 = vmatpush1.bf16.msra.mxu0 0
  %12615 = vmatprep.subr.bf16.mxu0 0
  %12616 = vmatpush1.bf16.msra.mxu0 0
  %12617 = vmatprep.subr.bf16.mxu0 0
  %12618 = vmatpush1.bf16.msra.mxu0 0
  %12619 = vmatprep.subr.bf16.mxu0 0
  %12620 = vmatpush1.bf16.msra.mxu0 0
  %12621 = vmatprep.subr.bf16.mxu0 0
  %12622 = vmatpush1.bf16.msra.mxu0 0
  %12623 = vmatprep.mubr.bf16.mxu0 0
  %12624 = vmatmul.mubr.bf16.gmra.mrb[0].mxu0 %v12589
  %v12625 = vpop.f32.mrb[0].mxu0
  %v12626 = vadd.f32 0.0, %v12625
  %v12627 = vpop.f32.mrb[0].mxu0
  %v12628 = vpop.f32.mrb[0].mxu0
  %v12629 = vpop.f32.mrb[0].mxu0
  %12630 = vdwg.mxu0
  %v12639 = vunpack.c.l.b16 %v8526
  %v12640 = vunpack.c.l.b16 %v8527
  %v12641 = vunpack.c.l.b16 %v8528
  %v12642 = vunpack.c.l.b16 %v8529
  %v12643 = vunpack.c.l.b16 %v8530
  %v12644 = vunpack.c.l.b16 %v8531
  %v12645 = vunpack.c.l.b16 %v8532
  %v12646 = vunpack.c.l.b16 %v8533
  %v12647 = vpack.c.b16 %v12640, %v12639
  %v12648 = vpack.c.b16 %v12642, %v12641
  %v12649 = vpack.c.b16 %v12644, %v12643
  %v12650 = vpack.c.b16 %v12646, %v12645
  %v12656 = vsel %vm8902, %v8034, 0
  %12658 = vmatprep.subr.bf16.mxu0 0
  %12659 = vmatpush1.bf16.msra.mxu0 %v12647
  %12660 = vmatprep.subr.bf16.mxu0 0
  %12661 = vmatpush1.bf16.msra.mxu0 %v12648
  %12662 = vmatprep.subr.bf16.mxu0 0
  %12663 = vmatpush1.bf16.msra.mxu0 %v12649
  %12664 = vmatprep.subr.bf16.mxu0 0
  %12665 = vmatpush1.bf16.msra.mxu0 %v12650
  %12666 = vmatprep.subr.bf16.mxu0 0
  %12667 = vmatpush1.bf16.msra.mxu0 0
  %12668 = vmatprep.subr.bf16.mxu0 0
  %12669 = vmatpush1.bf16.msra.mxu0 0
  %12670 = vmatprep.subr.bf16.mxu0 0
  %12671 = vmatpush1.bf16.msra.mxu0 0
  %12672 = vmatprep.subr.bf16.mxu0 0
  %12673 = vmatpush1.bf16.msra.mxu0 0
  %12674 = vmatprep.subr.bf16.mxu0 0
  %12675 = vmatpush1.bf16.msra.mxu0 0
  %12676 = vmatprep.subr.bf16.mxu0 0
  %12677 = vmatpush1.bf16.msra.mxu0 0
  %12678 = vmatprep.subr.bf16.mxu0 0
  %12679 = vmatpush1.bf16.msra.mxu0 0
  %12680 = vmatprep.subr.bf16.mxu0 0
  %12681 = vmatpush1.bf16.msra.mxu0 0
  %12682 = vmatprep.subr.bf16.mxu0 0
  %12683 = vmatpush1.bf16.msra.mxu0 0
  %12684 = vmatprep.subr.bf16.mxu0 0
  %12685 = vmatpush1.bf16.msra.mxu0 0
  %12686 = vmatprep.subr.bf16.mxu0 0
  %12687 = vmatpush1.bf16.msra.mxu0 0
  %12688 = vmatprep.subr.bf16.mxu0 0
  %12689 = vmatpush1.bf16.msra.mxu0 0
  %12690 = vmatprep.mubr.bf16.mxu0 0
  %12691 = vmatmul.mubr.bf16.gmra.mrb[0].mxu0 %v12656
  %v12692 = vpop.f32.mrb[0].mxu0
  %v12693 = vadd.f32 0.0, %v12692
  %v12694 = vpop.f32.mrb[0].mxu0
  %v12695 = vpop.f32.mrb[0].mxu0
  %v12696 = vpop.f32.mrb[0].mxu0
  %12697 = vdwg.mxu0
  %v12706 = vunpack.c.l.b16 %v8534
  %v12707 = vunpack.c.l.b16 %v8535
  %v12708 = vunpack.c.l.b16 %v8536
  %v12709 = vunpack.c.l.b16 %v8537
  %v12710 = vunpack.c.l.b16 %v8538
  %v12711 = vunpack.c.l.b16 %v8539
  %v12712 = vunpack.c.l.b16 %v8540
  %v12713 = vunpack.c.l.b16 %v8541
  %v12714 = vpack.c.b16 %v12707, %v12706
  %v12715 = vpack.c.b16 %v12709, %v12708
  %v12716 = vpack.c.b16 %v12711, %v12710
  %v12717 = vpack.c.b16 %v12713, %v12712
  %v12723 = vsel %vm8902, %v8035, 0
  %12725 = vmatprep.subr.bf16.mxu0 0
  %12726 = vmatpush1.bf16.msra.mxu0 %v12714
  %12727 = vmatprep.subr.bf16.mxu0 0
  %12728 = vmatpush1.bf16.msra.mxu0 %v12715
  %12729 = vmatprep.subr.bf16.mxu0 0
  %12730 = vmatpush1.bf16.msra.mxu0 %v12716
  %12731 = vmatprep.subr.bf16.mxu0 0
  %12732 = vmatpush1.bf16.msra.mxu0 %v12717
  %12733 = vmatprep.subr.bf16.mxu0 0
  %12734 = vmatpush1.bf16.msra.mxu0 0
  %12735 = vmatprep.subr.bf16.mxu0 0
  %12736 = vmatpush1.bf16.msra.mxu0 0
  %12737 = vmatprep.subr.bf16.mxu0 0
  %12738 = vmatpush1.bf16.msra.mxu0 0
  %12739 = vmatprep.subr.bf16.mxu0 0
  %12740 = vmatpush1.bf16.msra.mxu0 0
  %12741 = vmatprep.subr.bf16.mxu0 0
  %12742 = vmatpush1.bf16.msra.mxu0 0
  %12743 = vmatprep.subr.bf16.mxu0 0
  %12744 = vmatpush1.bf16.msra.mxu0 0
  %12745 = vmatprep.subr.bf16.mxu0 0
  %12746 = vmatpush1.bf16.msra.mxu0 0
  %12747 = vmatprep.subr.bf16.mxu0 0
  %12748 = vmatpush1.bf16.msra.mxu0 0
  %12749 = vmatprep.subr.bf16.mxu0 0
  %12750 = vmatpush1.bf16.msra.mxu0 0
  %12751 = vmatprep.subr.bf16.mxu0 0
  %12752 = vmatpush1.bf16.msra.mxu0 0
  %12753 = vmatprep.subr.bf16.mxu0 0
  %12754 = vmatpush1.bf16.msra.mxu0 0
  %12755 = vmatprep.subr.bf16.mxu0 0
  %12756 = vmatpush1.bf16.msra.mxu0 0
  %12757 = vmatprep.mubr.bf16.mxu0 0
  %12758 = vmatmul.mubr.bf16.gmra.mrb[0].mxu0 %v12723
  %v12759 = vpop.f32.mrb[0].mxu0
  %v12760 = vadd.f32 0.0, %v12759
  %v12761 = vpop.f32.mrb[0].mxu0
  %v12762 = vpop.f32.mrb[0].mxu0
  %v12763 = vpop.f32.mrb[0].mxu0
  %12764 = vdwg.mxu0
  %v12773 = vunpack.c.l.b16 %v8542
  %v12774 = vunpack.c.l.b16 %v8543
  %v12775 = vunpack.c.l.b16 %v8544
  %v12776 = vunpack.c.l.b16 %v8545
  %v12777 = vunpack.c.l.b16 %v8546
  %v12778 = vunpack.c.l.b16 %v8547
  %v12779 = vunpack.c.l.b16 %v8548
  %v12780 = vunpack.c.l.b16 %v8549
  %v12781 = vpack.c.b16 %v12774, %v12773
  %v12782 = vpack.c.b16 %v12776, %v12775
  %v12783 = vpack.c.b16 %v12778, %v12777
  %v12784 = vpack.c.b16 %v12780, %v12779
  %v12790 = vsel %vm8902, %v8036, 0
  %12792 = vmatprep.subr.bf16.mxu0 0
  %12793 = vmatpush1.bf16.msra.mxu0 %v12781
  %12794 = vmatprep.subr.bf16.mxu0 0
  %12795 = vmatpush1.bf16.msra.mxu0 %v12782
  %12796 = vmatprep.subr.bf16.mxu0 0
  %12797 = vmatpush1.bf16.msra.mxu0 %v12783
  %12798 = vmatprep.subr.bf16.mxu0 0
  %12799 = vmatpush1.bf16.msra.mxu0 %v12784
  %12800 = vmatprep.subr.bf16.mxu0 0
  %12801 = vmatpush1.bf16.msra.mxu0 0
  %12802 = vmatprep.subr.bf16.mxu0 0
  %12803 = vmatpush1.bf16.msra.mxu0 0
  %12804 = vmatprep.subr.bf16.mxu0 0
  %12805 = vmatpush1.bf16.msra.mxu0 0
  %12806 = vmatprep.subr.bf16.mxu0 0
  %12807 = vmatpush1.bf16.msra.mxu0 0
  %12808 = vmatprep.subr.bf16.mxu0 0
  %12809 = vmatpush1.bf16.msra.mxu0 0
  %12810 = vmatprep.subr.bf16.mxu0 0
  %12811 = vmatpush1.bf16.msra.mxu0 0
  %12812 = vmatprep.subr.bf16.mxu0 0
  %12813 = vmatpush1.bf16.msra.mxu0 0
  %12814 = vmatprep.subr.bf16.mxu0 0
  %12815 = vmatpush1.bf16.msra.mxu0 0
  %12816 = vmatprep.subr.bf16.mxu0 0
  %12817 = vmatpush1.bf16.msra.mxu0 0
  %12818 = vmatprep.subr.bf16.mxu0 0
  %12819 = vmatpush1.bf16.msra.mxu0 0
  %12820 = vmatprep.subr.bf16.mxu0 0
  %12821 = vmatpush1.bf16.msra.mxu0 0
  %12822 = vmatprep.subr.bf16.mxu0 0
  %12823 = vmatpush1.bf16.msra.mxu0 0
  %12824 = vmatprep.mubr.bf16.mxu0 0
  %12825 = vmatmul.mubr.bf16.gmra.mrb[0].mxu0 %v12790
  %v12826 = vpop.f32.mrb[0].mxu0
  %v12827 = vadd.f32 0.0, %v12826
  %v12828 = vpop.f32.mrb[0].mxu0
  %v12829 = vpop.f32.mrb[0].mxu0
  %v12830 = vpop.f32.mrb[0].mxu0
  %12831 = vdwg.mxu0
  %v12840 = vunpack.c.l.b16 %v8550
  %v12841 = vunpack.c.l.b16 %v8551
  %v12842 = vunpack.c.l.b16 %v8552
  %v12843 = vunpack.c.l.b16 %v8553
  %v12844 = vunpack.c.l.b16 %v8554
  %v12845 = vunpack.c.l.b16 %v8555
  %v12846 = vunpack.c.l.b16 %v8556
  %v12847 = vunpack.c.l.b16 %v8557
  %v12848 = vpack.c.b16 %v12841, %v12840
  %v12849 = vpack.c.b16 %v12843, %v12842
  %v12850 = vpack.c.b16 %v12845, %v12844
  %v12851 = vpack.c.b16 %v12847, %v12846
  %v12857 = vsel %vm8902, %v8037, 0
  %12859 = vmatprep.subr.bf16.mxu0 0
  %12860 = vmatpush1.bf16.msra.mxu0 %v12848
  %12861 = vmatprep.subr.bf16.mxu0 0
  %12862 = vmatpush1.bf16.msra.mxu0 %v12849
  %12863 = vmatprep.subr.bf16.mxu0 0
  %12864 = vmatpush1.bf16.msra.mxu0 %v12850
  %12865 = vmatprep.subr.bf16.mxu0 0
  %12866 = vmatpush1.bf16.msra.mxu0 %v12851
  %12867 = vmatprep.subr.bf16.mxu0 0
  %12868 = vmatpush1.bf16.msra.mxu0 0
  %12869 = vmatprep.subr.bf16.mxu0 0
  %12870 = vmatpush1.bf16.msra.mxu0 0
  %12871 = vmatprep.subr.bf16.mxu0 0
  %12872 = vmatpush1.bf16.msra.mxu0 0
  %12873 = vmatprep.subr.bf16.mxu0 0
  %12874 = vmatpush1.bf16.msra.mxu0 0
  %12875 = vmatprep.subr.bf16.mxu0 0
  %12876 = vmatpush1.bf16.msra.mxu0 0
  %12877 = vmatprep.subr.bf16.mxu0 0
  %12878 = vmatpush1.bf16.msra.mxu0 0
  %12879 = vmatprep.subr.bf16.mxu0 0
  %12880 = vmatpush1.bf16.msra.mxu0 0
  %12881 = vmatprep.subr.bf16.mxu0 0
  %12882 = vmatpush1.bf16.msra.mxu0 0
  %12883 = vmatprep.subr.bf16.mxu0 0
  %12884 = vmatpush1.bf16.msra.mxu0 0
  %12885 = vmatprep.subr.bf16.mxu0 0
  %12886 = vmatpush1.bf16.msra.mxu0 0
  %12887 = vmatprep.subr.bf16.mxu0 0
  %12888 = vmatpush1.bf16.msra.mxu0 0
  %12889 = vmatprep.subr.bf16.mxu0 0
  %12890 = vmatpush1.bf16.msra.mxu0 0
  %12891 = vmatprep.mubr.bf16.mxu0 0
  %12892 = vmatmul.mubr.bf16.gmra.mrb[0].mxu0 %v12857
  %v12893 = vpop.f32.mrb[0].mxu0
  %v12894 = vadd.f32 0.0, %v12893
  %v12895 = vpop.f32.mrb[0].mxu0
  %v12896 = vpop.f32.mrb[0].mxu0
  %v12897 = vpop.f32.mrb[0].mxu0
  %12898 = vdwg.mxu0
  %v12907 = vunpack.c.l.b16 %v8558
  %v12908 = vunpack.c.l.b16 %v8559
  %v12909 = vunpack.c.l.b16 %v8560
  %v12910 = vunpack.c.l.b16 %v8561
  %v12911 = vunpack.c.l.b16 %v8562
  %v12912 = vunpack.c.l.b16 %v8563
  %v12913 = vunpack.c.l.b16 %v8564
  %v12914 = vunpack.c.l.b16 %v8565
  %v12915 = vpack.c.b16 %v12908, %v12907
  %v12916 = vpack.c.b16 %v12910, %v12909
  %v12917 = vpack.c.b16 %v12912, %v12911
  %v12918 = vpack.c.b16 %v12914, %v12913
  %v12924 = vsel %vm8902, %v8038, 0
  %12926 = vmatprep.subr.bf16.mxu0 0
  %12927 = vmatpush1.bf16.msra.mxu0 %v12915
  %12928 = vmatprep.subr.bf16.mxu0 0
  %12929 = vmatpush1.bf16.msra.mxu0 %v12916
  %12930 = vmatprep.subr.bf16.mxu0 0
  %12931 = vmatpush1.bf16.msra.mxu0 %v12917
  %12932 = vmatprep.subr.bf16.mxu0 0
  %12933 = vmatpush1.bf16.msra.mxu0 %v12918
  %12934 = vmatprep.subr.bf16.mxu0 0
  %12935 = vmatpush1.bf16.msra.mxu0 0
  %12936 = vmatprep.subr.bf16.mxu0 0
  %12937 = vmatpush1.bf16.msra.mxu0 0
  %12938 = vmatprep.subr.bf16.mxu0 0
  %12939 = vmatpush1.bf16.msra.mxu0 0
  %12940 = vmatprep.subr.bf16.mxu0 0
  %12941 = vmatpush1.bf16.msra.mxu0 0
  %12942 = vmatprep.subr.bf16.mxu0 0
  %12943 = vmatpush1.bf16.msra.mxu0 0
  %12944 = vmatprep.subr.bf16.mxu0 0
  %12945 = vmatpush1.bf16.msra.mxu0 0
  %12946 = vmatprep.subr.bf16.mxu0 0
  %12947 = vmatpush1.bf16.msra.mxu0 0
  %12948 = vmatprep.subr.bf16.mxu0 0
  %12949 = vmatpush1.bf16.msra.mxu0 0
  %12950 = vmatprep.subr.bf16.mxu0 0
  %12951 = vmatpush1.bf16.msra.mxu0 0
  %12952 = vmatprep.subr.bf16.mxu0 0
  %12953 = vmatpush1.bf16.msra.mxu0 0
  %12954 = vmatprep.subr.bf16.mxu0 0
  %12955 = vmatpush1.bf16.msra.mxu0 0
  %12956 = vmatprep.subr.bf16.mxu0 0
  %12957 = vmatpush1.bf16.msra.mxu0 0
  %12958 = vmatprep.mubr.bf16.mxu0 0
  %12959 = vmatmul.mubr.bf16.gmra.mrb[0].mxu0 %v12924
  %v12960 = vpop.f32.mrb[0].mxu0
  %v12961 = vadd.f32 0.0, %v12960
  %v12962 = vpop.f32.mrb[0].mxu0
  %v12963 = vpop.f32.mrb[0].mxu0
  %v12964 = vpop.f32.mrb[0].mxu0
  %12965 = vdwg.mxu0
  %v12974 = vunpack.c.l.b16 %v8566
  %v12975 = vunpack.c.l.b16 %v8567
  %v12976 = vunpack.c.l.b16 %v8568
  %v12977 = vunpack.c.l.b16 %v8569
  %v12978 = vunpack.c.l.b16 %v8570
  %v12979 = vunpack.c.l.b16 %v8571
  %v12980 = vunpack.c.l.b16 %v8572
  %v12981 = vunpack.c.l.b16 %v8573
  %v12982 = vpack.c.b16 %v12975, %v12974
  %v12983 = vpack.c.b16 %v12977, %v12976
  %v12984 = vpack.c.b16 %v12979, %v12978
  %v12985 = vpack.c.b16 %v12981, %v12980
  %v12991 = vsel %vm8902, %v8039, 0
  %12993 = vmatprep.subr.bf16.mxu0 0
  %12994 = vmatpush1.bf16.msra.mxu0 %v12982
  %12995 = vmatprep.subr.bf16.mxu0 0
  %12996 = vmatpush1.bf16.msra.mxu0 %v12983
  %12997 = vmatprep.subr.bf16.mxu0 0
  %12998 = vmatpush1.bf16.msra.mxu0 %v12984
  %12999 = vmatprep.subr.bf16.mxu0 0
  %13000 = vmatpush1.bf16.msra.mxu0 %v12985
  %13001 = vmatprep.subr.bf16.mxu0 0
  %13002 = vmatpush1.bf16.msra.mxu0 0
  %13003 = vmatprep.subr.bf16.mxu0 0
  %13004 = vmatpush1.bf16.msra.mxu0 0
  %13005 = vmatprep.subr.bf16.mxu0 0
  %13006 = vmatpush1.bf16.msra.mxu0 0
  %13007 = vmatprep.subr.bf16.mxu0 0
  %13008 = vmatpush1.bf16.msra.mxu0 0
  %13009 = vmatprep.subr.bf16.mxu0 0
  %13010 = vmatpush1.bf16.msra.mxu0 0
  %13011 = vmatprep.subr.bf16.mxu0 0
  %13012 = vmatpush1.bf16.msra.mxu0 0
  %13013 = vmatprep.subr.bf16.mxu0 0
  %13014 = vmatpush1.bf16.msra.mxu0 0
  %13015 = vmatprep.subr.bf16.mxu0 0
  %13016 = vmatpush1.bf16.msra.mxu0 0
  %13017 = vmatprep.subr.bf16.mxu0 0
  %13018 = vmatpush1.bf16.msra.mxu0 0
  %13019 = vmatprep.subr.bf16.mxu0 0
  %13020 = vmatpush1.bf16.msra.mxu0 0
  %13021 = vmatprep.subr.bf16.mxu0 0
  %13022 = vmatpush1.bf16.msra.mxu0 0
  %13023 = vmatprep.subr.bf16.mxu0 0
  %13024 = vmatpush1.bf16.msra.mxu0 0
  %13025 = vmatprep.mubr.bf16.mxu0 0
  %13026 = vmatmul.mubr.bf16.gmra.mrb[0].mxu0 %v12991
  %v13027 = vpop.f32.mrb[0].mxu0
  %v13028 = vadd.f32 0.0, %v13027
  %v13029 = vpop.f32.mrb[0].mxu0
  %v13030 = vpop.f32.mrb[0].mxu0
  %v13031 = vpop.f32.mrb[0].mxu0
  %13032 = vdwg.mxu0
  %v13041 = vunpack.c.l.b16 %v8574
  %v13042 = vunpack.c.l.b16 %v8575
  %v13043 = vunpack.c.l.b16 %v8576
  %v13044 = vunpack.c.l.b16 %v8577
  %v13045 = vunpack.c.l.b16 %v8578
  %v13046 = vunpack.c.l.b16 %v8579
  %v13047 = vunpack.c.l.b16 %v8580
  %v13048 = vunpack.c.l.b16 %v8581
  %v13049 = vpack.c.b16 %v13042, %v13041
  %v13050 = vpack.c.b16 %v13044, %v13043
  %v13051 = vpack.c.b16 %v13046, %v13045
  %v13052 = vpack.c.b16 %v13048, %v13047
  %v13058 = vsel %vm8902, %v8040, 0
  %13060 = vmatprep.subr.bf16.mxu0 0
  %13061 = vmatpush1.bf16.msra.mxu0 %v13049
  %13062 = vmatprep.subr.bf16.mxu0 0
  %13063 = vmatpush1.bf16.msra.mxu0 %v13050
  %13064 = vmatprep.subr.bf16.mxu0 0
  %13065 = vmatpush1.bf16.msra.mxu0 %v13051
  %13066 = vmatprep.subr.bf16.mxu0 0
  %13067 = vmatpush1.bf16.msra.mxu0 %v13052
  %13068 = vmatprep.subr.bf16.mxu0 0
  %13069 = vmatpush1.bf16.msra.mxu0 0
  %13070 = vmatprep.subr.bf16.mxu0 0
  %13071 = vmatpush1.bf16.msra.mxu0 0
  %13072 = vmatprep.subr.bf16.mxu0 0
  %13073 = vmatpush1.bf16.msra.mxu0 0
  %13074 = vmatprep.subr.bf16.mxu0 0
  %13075 = vmatpush1.bf16.msra.mxu0 0
  %13076 = vmatprep.subr.bf16.mxu0 0
  %13077 = vmatpush1.bf16.msra.mxu0 0
  %13078 = vmatprep.subr.bf16.mxu0 0
  %13079 = vmatpush1.bf16.msra.mxu0 0
  %13080 = vmatprep.subr.bf16.mxu0 0
  %13081 = vmatpush1.bf16.msra.mxu0 0
  %13082 = vmatprep.subr.bf16.mxu0 0
  %13083 = vmatpush1.bf16.msra.mxu0 0
  %13084 = vmatprep.subr.bf16.mxu0 0
  %13085 = vmatpush1.bf16.msra.mxu0 0
  %13086 = vmatprep.subr.bf16.mxu0 0
  %13087 = vmatpush1.bf16.msra.mxu0 0
  %13088 = vmatprep.subr.bf16.mxu0 0
  %13089 = vmatpush1.bf16.msra.mxu0 0
  %13090 = vmatprep.subr.bf16.mxu0 0
  %13091 = vmatpush1.bf16.msra.mxu0 0
  %13092 = vmatprep.mubr.bf16.mxu0 0
  %13093 = vmatmul.mubr.bf16.gmra.mrb[0].mxu0 %v13058
  %v13094 = vpop.f32.mrb[0].mxu0
  %v13095 = vadd.f32 0.0, %v13094
  %v13096 = vpop.f32.mrb[0].mxu0
  %v13097 = vpop.f32.mrb[0].mxu0
  %v13098 = vpop.f32.mrb[0].mxu0
  %13099 = vdwg.mxu0
  %v13108 = vunpack.c.l.b16 %v8582
  %v13109 = vunpack.c.l.b16 %v8583
  %v13110 = vunpack.c.l.b16 %v8584
  %v13111 = vunpack.c.l.b16 %v8585
  %v13112 = vunpack.c.l.b16 %v8586
  %v13113 = vunpack.c.l.b16 %v8587
  %v13114 = vunpack.c.l.b16 %v8588
  %v13115 = vunpack.c.l.b16 %v8589
  %v13116 = vpack.c.b16 %v13109, %v13108
  %v13117 = vpack.c.b16 %v13111, %v13110
  %v13118 = vpack.c.b16 %v13113, %v13112
  %v13119 = vpack.c.b16 %v13115, %v13114
  %v13125 = vsel %vm8902, %v8041, 0
  %13127 = vmatprep.subr.bf16.mxu0 0
  %13128 = vmatpush1.bf16.msra.mxu0 %v13116
  %13129 = vmatprep.subr.bf16.mxu0 0
  %13130 = vmatpush1.bf16.msra.mxu0 %v13117
  %13131 = vmatprep.subr.bf16.mxu0 0
  %13132 = vmatpush1.bf16.msra.mxu0 %v13118
  %13133 = vmatprep.subr.bf16.mxu0 0
  %13134 = vmatpush1.bf16.msra.mxu0 %v13119
  %13135 = vmatprep.subr.bf16.mxu0 0
  %13136 = vmatpush1.bf16.msra.mxu0 0
  %13137 = vmatprep.subr.bf16.mxu0 0
  %13138 = vmatpush1.bf16.msra.mxu0 0
  %13139 = vmatprep.subr.bf16.mxu0 0
  %13140 = vmatpush1.bf16.msra.mxu0 0
  %13141 = vmatprep.subr.bf16.mxu0 0
  %13142 = vmatpush1.bf16.msra.mxu0 0
  %13143 = vmatprep.subr.bf16.mxu0 0
  %13144 = vmatpush1.bf16.msra.mxu0 0
  %13145 = vmatprep.subr.bf16.mxu0 0
  %13146 = vmatpush1.bf16.msra.mxu0 0
  %13147 = vmatprep.subr.bf16.mxu0 0
  %13148 = vmatpush1.bf16.msra.mxu0 0
  %13149 = vmatprep.subr.bf16.mxu0 0
  %13150 = vmatpush1.bf16.msra.mxu0 0
  %13151 = vmatprep.subr.bf16.mxu0 0
  %13152 = vmatpush1.bf16.msra.mxu0 0
  %13153 = vmatprep.subr.bf16.mxu0 0
  %13154 = vmatpush1.bf16.msra.mxu0 0
  %13155 = vmatprep.subr.bf16.mxu0 0
  %13156 = vmatpush1.bf16.msra.mxu0 0
  %13157 = vmatprep.subr.bf16.mxu0 0
  %13158 = vmatpush1.bf16.msra.mxu0 0
  %13159 = vmatprep.mubr.bf16.mxu0 0
  %13160 = vmatmul.mubr.bf16.gmra.mrb[0].mxu0 %v13125
  %v13161 = vpop.f32.mrb[0].mxu0
  %v13162 = vadd.f32 0.0, %v13161
  %v13163 = vpop.f32.mrb[0].mxu0
  %v13164 = vpop.f32.mrb[0].mxu0
  %v13165 = vpop.f32.mrb[0].mxu0
  %13166 = vdwg.mxu0
  %v13175 = vunpack.c.l.b16 %v8590
  %v13176 = vunpack.c.l.b16 %v8591
  %v13177 = vunpack.c.l.b16 %v8592
  %v13178 = vunpack.c.l.b16 %v8593
  %v13179 = vunpack.c.l.b16 %v8594
  %v13180 = vunpack.c.l.b16 %v8595
  %v13181 = vunpack.c.l.b16 %v8596
  %v13182 = vunpack.c.l.b16 %v8597
  %v13183 = vpack.c.b16 %v13176, %v13175
  %v13184 = vpack.c.b16 %v13178, %v13177
  %v13185 = vpack.c.b16 %v13180, %v13179
  %v13186 = vpack.c.b16 %v13182, %v13181
  %v13192 = vsel %vm8902, %v8042, 0
  %13194 = vmatprep.subr.bf16.mxu0 0
  %13195 = vmatpush1.bf16.msra.mxu0 %v13183
  %13196 = vmatprep.subr.bf16.mxu0 0
  %13197 = vmatpush1.bf16.msra.mxu0 %v13184
  %13198 = vmatprep.subr.bf16.mxu0 0
  %13199 = vmatpush1.bf16.msra.mxu0 %v13185
  %13200 = vmatprep.subr.bf16.mxu0 0
  %13201 = vmatpush1.bf16.msra.mxu0 %v13186
  %13202 = vmatprep.subr.bf16.mxu0 0
  %13203 = vmatpush1.bf16.msra.mxu0 0
  %13204 = vmatprep.subr.bf16.mxu0 0
  %13205 = vmatpush1.bf16.msra.mxu0 0
  %13206 = vmatprep.subr.bf16.mxu0 0
  %13207 = vmatpush1.bf16.msra.mxu0 0
  %13208 = vmatprep.subr.bf16.mxu0 0
  %13209 = vmatpush1.bf16.msra.mxu0 0
  %13210 = vmatprep.subr.bf16.mxu0 0
  %13211 = vmatpush1.bf16.msra.mxu0 0
  %13212 = vmatprep.subr.bf16.mxu0 0
  %13213 = vmatpush1.bf16.msra.mxu0 0
  %13214 = vmatprep.subr.bf16.mxu0 0
  %13215 = vmatpush1.bf16.msra.mxu0 0
  %13216 = vmatprep.subr.bf16.mxu0 0
  %13217 = vmatpush1.bf16.msra.mxu0 0
  %13218 = vmatprep.subr.bf16.mxu0 0
  %13219 = vmatpush1.bf16.msra.mxu0 0
  %13220 = vmatprep.subr.bf16.mxu0 0
  %13221 = vmatpush1.bf16.msra.mxu0 0
  %13222 = vmatprep.subr.bf16.mxu0 0
  %13223 = vmatpush1.bf16.msra.mxu0 0
  %13224 = vmatprep.subr.bf16.mxu0 0
  %13225 = vmatpush1.bf16.msra.mxu0 0
  %13226 = vmatprep.mubr.bf16.mxu0 0
  %13227 = vmatmul.mubr.bf16.gmra.mrb[0].mxu0 %v13192
  %v13228 = vpop.f32.mrb[0].mxu0
  %v13229 = vadd.f32 0.0, %v13228
  %v13230 = vpop.f32.mrb[0].mxu0
  %v13231 = vpop.f32.mrb[0].mxu0
  %v13232 = vpop.f32.mrb[0].mxu0
  %13233 = vdwg.mxu0
  %v13242 = vunpack.c.l.b16 %v8598
  %v13243 = vunpack.c.l.b16 %v8599
  %v13244 = vunpack.c.l.b16 %v8600
  %v13245 = vunpack.c.l.b16 %v8601
  %v13246 = vunpack.c.l.b16 %v8602
  %v13247 = vunpack.c.l.b16 %v8603
  %v13248 = vunpack.c.l.b16 %v8604
  %v13249 = vunpack.c.l.b16 %v8605
  %v13250 = vpack.c.b16 %v13243, %v13242
  %v13251 = vpack.c.b16 %v13245, %v13244
  %v13252 = vpack.c.b16 %v13247, %v13246
  %v13253 = vpack.c.b16 %v13249, %v13248
  %v13259 = vsel %vm8902, %v8043, 0
  %13261 = vmatprep.subr.bf16.mxu0 0
  %13262 = vmatpush1.bf16.msra.mxu0 %v13250
  %13263 = vmatprep.subr.bf16.mxu0 0
  %13264 = vmatpush1.bf16.msra.mxu0 %v13251
  %13265 = vmatprep.subr.bf16.mxu0 0
  %13266 = vmatpush1.bf16.msra.mxu0 %v13252
  %13267 = vmatprep.subr.bf16.mxu0 0
  %13268 = vmatpush1.bf16.msra.mxu0 %v13253
  %13269 = vmatprep.subr.bf16.mxu0 0
  %13270 = vmatpush1.bf16.msra.mxu0 0
  %13271 = vmatprep.subr.bf16.mxu0 0
  %13272 = vmatpush1.bf16.msra.mxu0 0
  %13273 = vmatprep.subr.bf16.mxu0 0
  %13274 = vmatpush1.bf16.msra.mxu0 0
  %13275 = vmatprep.subr.bf16.mxu0 0
  %13276 = vmatpush1.bf16.msra.mxu0 0
  %13277 = vmatprep.subr.bf16.mxu0 0
  %13278 = vmatpush1.bf16.msra.mxu0 0
  %13279 = vmatprep.subr.bf16.mxu0 0
  %13280 = vmatpush1.bf16.msra.mxu0 0
  %13281 = vmatprep.subr.bf16.mxu0 0
  %13282 = vmatpush1.bf16.msra.mxu0 0
  %13283 = vmatprep.subr.bf16.mxu0 0
  %13284 = vmatpush1.bf16.msra.mxu0 0
  %13285 = vmatprep.subr.bf16.mxu0 0
  %13286 = vmatpush1.bf16.msra.mxu0 0
  %13287 = vmatprep.subr.bf16.mxu0 0
  %13288 = vmatpush1.bf16.msra.mxu0 0
  %13289 = vmatprep.subr.bf16.mxu0 0
  %13290 = vmatpush1.bf16.msra.mxu0 0
  %13291 = vmatprep.subr.bf16.mxu0 0
  %13292 = vmatpush1.bf16.msra.mxu0 0
  %13293 = vmatprep.mubr.bf16.mxu0 0
  %13294 = vmatmul.mubr.bf16.gmra.mrb[0].mxu0 %v13259
  %v13295 = vpop.f32.mrb[0].mxu0
  %v13296 = vadd.f32 0.0, %v13295
  %v13297 = vpop.f32.mrb[0].mxu0
  %v13298 = vpop.f32.mrb[0].mxu0
  %v13299 = vpop.f32.mrb[0].mxu0
  %13300 = vdwg.mxu0
  %v13309 = vunpack.c.l.b16 %v8606
  %v13310 = vunpack.c.l.b16 %v8607
  %v13311 = vunpack.c.l.b16 %v8608
  %v13312 = vunpack.c.l.b16 %v8609
  %v13313 = vunpack.c.l.b16 %v8610
  %v13314 = vunpack.c.l.b16 %v8611
  %v13315 = vunpack.c.l.b16 %v8612
  %v13316 = vunpack.c.l.b16 %v8613
  %v13317 = vpack.c.b16 %v13310, %v13309
  %v13318 = vpack.c.b16 %v13312, %v13311
  %v13319 = vpack.c.b16 %v13314, %v13313
  %v13320 = vpack.c.b16 %v13316, %v13315
  %v13326 = vsel %vm8902, %v8044, 0
  %13328 = vmatprep.subr.bf16.mxu0 0
  %13329 = vmatpush1.bf16.msra.mxu0 %v13317
  %13330 = vmatprep.subr.bf16.mxu0 0
  %13331 = vmatpush1.bf16.msra.mxu0 %v13318
  %13332 = vmatprep.subr.bf16.mxu0 0
  %13333 = vmatpush1.bf16.msra.mxu0 %v13319
  %13334 = vmatprep.subr.bf16.mxu0 0
  %13335 = vmatpush1.bf16.msra.mxu0 %v13320
  %13336 = vmatprep.subr.bf16.mxu0 0
  %13337 = vmatpush1.bf16.msra.mxu0 0
  %13338 = vmatprep.subr.bf16.mxu0 0
  %13339 = vmatpush1.bf16.msra.mxu0 0
  %13340 = vmatprep.subr.bf16.mxu0 0
  %13341 = vmatpush1.bf16.msra.mxu0 0
  %13342 = vmatprep.subr.bf16.mxu0 0
  %13343 = vmatpush1.bf16.msra.mxu0 0
  %13344 = vmatprep.subr.bf16.mxu0 0
  %13345 = vmatpush1.bf16.msra.mxu0 0
  %13346 = vmatprep.subr.bf16.mxu0 0
  %13347 = vmatpush1.bf16.msra.mxu0 0
  %13348 = vmatprep.subr.bf16.mxu0 0
  %13349 = vmatpush1.bf16.msra.mxu0 0
  %13350 = vmatprep.subr.bf16.mxu0 0
  %13351 = vmatpush1.bf16.msra.mxu0 0
  %13352 = vmatprep.subr.bf16.mxu0 0
  %13353 = vmatpush1.bf16.msra.mxu0 0
  %13354 = vmatprep.subr.bf16.mxu0 0
  %13355 = vmatpush1.bf16.msra.mxu0 0
  %13356 = vmatprep.subr.bf16.mxu0 0
  %13357 = vmatpush1.bf16.msra.mxu0 0
  %13358 = vmatprep.subr.bf16.mxu0 0
  %13359 = vmatpush1.bf16.msra.mxu0 0
  %13360 = vmatprep.mubr.bf16.mxu0 0
  %13361 = vmatmul.mubr.bf16.gmra.mrb[0].mxu0 %v13326
  %v13362 = vpop.f32.mrb[0].mxu0
  %v13363 = vadd.f32 0.0, %v13362
  %v13364 = vpop.f32.mrb[0].mxu0
  %v13365 = vpop.f32.mrb[0].mxu0
  %v13366 = vpop.f32.mrb[0].mxu0
  %13367 = vdwg.mxu0
  %v13376 = vunpack.c.l.b16 %v8614
  %v13377 = vunpack.c.l.b16 %v8615
  %v13378 = vunpack.c.l.b16 %v8616
  %v13379 = vunpack.c.l.b16 %v8617
  %v13380 = vunpack.c.l.b16 %v8618
  %v13381 = vunpack.c.l.b16 %v8619
  %v13382 = vunpack.c.l.b16 %v8620
  %v13383 = vunpack.c.l.b16 %v8621
  %v13384 = vpack.c.b16 %v13377, %v13376
  %v13385 = vpack.c.b16 %v13379, %v13378
  %v13386 = vpack.c.b16 %v13381, %v13380
  %v13387 = vpack.c.b16 %v13383, %v13382
  %v13393 = vsel %vm8902, %v8045, 0
  %13395 = vmatprep.subr.bf16.mxu0 0
  %13396 = vmatpush1.bf16.msra.mxu0 %v13384
  %13397 = vmatprep.subr.bf16.mxu0 0
  %13398 = vmatpush1.bf16.msra.mxu0 %v13385
  %13399 = vmatprep.subr.bf16.mxu0 0
  %13400 = vmatpush1.bf16.msra.mxu0 %v13386
  %13401 = vmatprep.subr.bf16.mxu0 0
  %13402 = vmatpush1.bf16.msra.mxu0 %v13387
  %13403 = vmatprep.subr.bf16.mxu0 0
  %13404 = vmatpush1.bf16.msra.mxu0 0
  %13405 = vmatprep.subr.bf16.mxu0 0
  %13406 = vmatpush1.bf16.msra.mxu0 0
  %13407 = vmatprep.subr.bf16.mxu0 0
  %13408 = vmatpush1.bf16.msra.mxu0 0
  %13409 = vmatprep.subr.bf16.mxu0 0
  %13410 = vmatpush1.bf16.msra.mxu0 0
  %13411 = vmatprep.subr.bf16.mxu0 0
  %13412 = vmatpush1.bf16.msra.mxu0 0
  %13413 = vmatprep.subr.bf16.mxu0 0
  %13414 = vmatpush1.bf16.msra.mxu0 0
  %13415 = vmatprep.subr.bf16.mxu0 0
  %13416 = vmatpush1.bf16.msra.mxu0 0
  %13417 = vmatprep.subr.bf16.mxu0 0
  %13418 = vmatpush1.bf16.msra.mxu0 0
  %13419 = vmatprep.subr.bf16.mxu0 0
  %13420 = vmatpush1.bf16.msra.mxu0 0
  %13421 = vmatprep.subr.bf16.mxu0 0
  %13422 = vmatpush1.bf16.msra.mxu0 0
  %13423 = vmatprep.subr.bf16.mxu0 0
  %13424 = vmatpush1.bf16.msra.mxu0 0
  %13425 = vmatprep.subr.bf16.mxu0 0
  %13426 = vmatpush1.bf16.msra.mxu0 0
  %13427 = vmatprep.mubr.bf16.mxu0 0
  %13428 = vmatmul.mubr.bf16.gmra.mrb[0].mxu0 %v13393
  %v13429 = vpop.f32.mrb[0].mxu0
  %v13430 = vadd.f32 0.0, %v13429
  %v13431 = vpop.f32.mrb[0].mxu0
  %v13432 = vpop.f32.mrb[0].mxu0
  %v13433 = vpop.f32.mrb[0].mxu0
  %13434 = vdwg.mxu0
  %v13443 = vunpack.c.l.b16 %v8622
  %v13444 = vunpack.c.l.b16 %v8623
  %v13445 = vunpack.c.l.b16 %v8624
  %v13446 = vunpack.c.l.b16 %v8625
  %v13447 = vunpack.c.l.b16 %v8626
  %v13448 = vunpack.c.l.b16 %v8627
  %v13449 = vunpack.c.l.b16 %v8628
  %v13450 = vunpack.c.l.b16 %v8629
  %v13451 = vpack.c.b16 %v13444, %v13443
  %v13452 = vpack.c.b16 %v13446, %v13445
  %v13453 = vpack.c.b16 %v13448, %v13447
  %v13454 = vpack.c.b16 %v13450, %v13449
  %v13460 = vsel %vm8902, %v8046, 0
  %13462 = vmatprep.subr.bf16.mxu0 0
  %13463 = vmatpush1.bf16.msra.mxu0 %v13451
  %13464 = vmatprep.subr.bf16.mxu0 0
  %13465 = vmatpush1.bf16.msra.mxu0 %v13452
  %13466 = vmatprep.subr.bf16.mxu0 0
  %13467 = vmatpush1.bf16.msra.mxu0 %v13453
  %13468 = vmatprep.subr.bf16.mxu0 0
  %13469 = vmatpush1.bf16.msra.mxu0 %v13454
  %13470 = vmatprep.subr.bf16.mxu0 0
  %13471 = vmatpush1.bf16.msra.mxu0 0
  %13472 = vmatprep.subr.bf16.mxu0 0
  %13473 = vmatpush1.bf16.msra.mxu0 0
  %13474 = vmatprep.subr.bf16.mxu0 0
  %13475 = vmatpush1.bf16.msra.mxu0 0
  %13476 = vmatprep.subr.bf16.mxu0 0
  %13477 = vmatpush1.bf16.msra.mxu0 0
  %13478 = vmatprep.subr.bf16.mxu0 0
  %13479 = vmatpush1.bf16.msra.mxu0 0
  %13480 = vmatprep.subr.bf16.mxu0 0
  %13481 = vmatpush1.bf16.msra.mxu0 0
  %13482 = vmatprep.subr.bf16.mxu0 0
  %13483 = vmatpush1.bf16.msra.mxu0 0
  %13484 = vmatprep.subr.bf16.mxu0 0
  %13485 = vmatpush1.bf16.msra.mxu0 0
  %13486 = vmatprep.subr.bf16.mxu0 0
  %13487 = vmatpush1.bf16.msra.mxu0 0
  %13488 = vmatprep.subr.bf16.mxu0 0
  %13489 = vmatpush1.bf16.msra.mxu0 0
  %13490 = vmatprep.subr.bf16.mxu0 0
  %13491 = vmatpush1.bf16.msra.mxu0 0
  %13492 = vmatprep.subr.bf16.mxu0 0
  %13493 = vmatpush1.bf16.msra.mxu0 0
  %13494 = vmatprep.mubr.bf16.mxu0 0
  %13495 = vmatmul.mubr.bf16.gmra.mrb[0].mxu0 %v13460
  %v13496 = vpop.f32.mrb[0].mxu0
  %v13497 = vadd.f32 0.0, %v13496
  %v13498 = vpop.f32.mrb[0].mxu0
  %v13499 = vpop.f32.mrb[0].mxu0
  %v13500 = vpop.f32.mrb[0].mxu0
  %13501 = vdwg.mxu0
  %v13510 = vunpack.c.l.b16 %v8630
  %v13511 = vunpack.c.l.b16 %v8631
  %v13512 = vunpack.c.l.b16 %v8632
  %v13513 = vunpack.c.l.b16 %v8633
  %v13514 = vunpack.c.l.b16 %v8634
  %v13515 = vunpack.c.l.b16 %v8635
  %v13516 = vunpack.c.l.b16 %v8636
  %v13517 = vunpack.c.l.b16 %v8637
  %v13518 = vpack.c.b16 %v13511, %v13510
  %v13519 = vpack.c.b16 %v13513, %v13512
  %v13520 = vpack.c.b16 %v13515, %v13514
  %v13521 = vpack.c.b16 %v13517, %v13516
  %v13527 = vsel %vm8902, %v8047, 0
  %13529 = vmatprep.subr.bf16.mxu0 0
  %13530 = vmatpush1.bf16.msra.mxu0 %v13518
  %13531 = vmatprep.subr.bf16.mxu0 0
  %13532 = vmatpush1.bf16.msra.mxu0 %v13519
  %13533 = vmatprep.subr.bf16.mxu0 0
  %13534 = vmatpush1.bf16.msra.mxu0 %v13520
  %13535 = vmatprep.subr.bf16.mxu0 0
  %13536 = vmatpush1.bf16.msra.mxu0 %v13521
  %13537 = vmatprep.subr.bf16.mxu0 0
  %13538 = vmatpush1.bf16.msra.mxu0 0
  %13539 = vmatprep.subr.bf16.mxu0 0
  %13540 = vmatpush1.bf16.msra.mxu0 0
  %13541 = vmatprep.subr.bf16.mxu0 0
  %13542 = vmatpush1.bf16.msra.mxu0 0
  %13543 = vmatprep.subr.bf16.mxu0 0
  %13544 = vmatpush1.bf16.msra.mxu0 0
  %13545 = vmatprep.subr.bf16.mxu0 0
  %13546 = vmatpush1.bf16.msra.mxu0 0
  %13547 = vmatprep.subr.bf16.mxu0 0
  %13548 = vmatpush1.bf16.msra.mxu0 0
  %13549 = vmatprep.subr.bf16.mxu0 0
  %13550 = vmatpush1.bf16.msra.mxu0 0
  %13551 = vmatprep.subr.bf16.mxu0 0
  %13552 = vmatpush1.bf16.msra.mxu0 0
  %13553 = vmatprep.subr.bf16.mxu0 0
  %13554 = vmatpush1.bf16.msra.mxu0 0
  %13555 = vmatprep.subr.bf16.mxu0 0
  %13556 = vmatpush1.bf16.msra.mxu0 0
  %13557 = vmatprep.subr.bf16.mxu0 0
  %13558 = vmatpush1.bf16.msra.mxu0 0
  %13559 = vmatprep.subr.bf16.mxu0 0
  %13560 = vmatpush1.bf16.msra.mxu0 0
  %13561 = vmatprep.mubr.bf16.mxu0 0
  %13562 = vmatmul.mubr.bf16.gmra.mrb[0].mxu0 %v13527
  %v13563 = vpop.f32.mrb[0].mxu0
  %v13564 = vadd.f32 0.0, %v13563
  %v13565 = vpop.f32.mrb[0].mxu0
  %v13566 = vpop.f32.mrb[0].mxu0
  %v13567 = vpop.f32.mrb[0].mxu0
  %13568 = vdwg.mxu0
  %v13577 = vunpack.c.l.b16 %v8638
  %v13578 = vunpack.c.l.b16 %v8639
  %v13579 = vunpack.c.l.b16 %v8640
  %v13580 = vunpack.c.l.b16 %v8641
  %v13581 = vunpack.c.l.b16 %v8642
  %v13582 = vunpack.c.l.b16 %v8643
  %v13583 = vunpack.c.l.b16 %v8644
  %v13584 = vunpack.c.l.b16 %v8645
  %v13585 = vpack.c.b16 %v13578, %v13577
  %v13586 = vpack.c.b16 %v13580, %v13579
  %v13587 = vpack.c.b16 %v13582, %v13581
  %v13588 = vpack.c.b16 %v13584, %v13583
  %v13594 = vsel %vm8902, %v8048, 0
  %13596 = vmatprep.subr.bf16.mxu0 0
  %13597 = vmatpush1.bf16.msra.mxu0 %v13585
  %13598 = vmatprep.subr.bf16.mxu0 0
  %13599 = vmatpush1.bf16.msra.mxu0 %v13586
  %13600 = vmatprep.subr.bf16.mxu0 0
  %13601 = vmatpush1.bf16.msra.mxu0 %v13587
  %13602 = vmatprep.subr.bf16.mxu0 0
  %13603 = vmatpush1.bf16.msra.mxu0 %v13588
  %13604 = vmatprep.subr.bf16.mxu0 0
  %13605 = vmatpush1.bf16.msra.mxu0 0
  %13606 = vmatprep.subr.bf16.mxu0 0
  %13607 = vmatpush1.bf16.msra.mxu0 0
  %13608 = vmatprep.subr.bf16.mxu0 0
  %13609 = vmatpush1.bf16.msra.mxu0 0
  %13610 = vmatprep.subr.bf16.mxu0 0
  %13611 = vmatpush1.bf16.msra.mxu0 0
  %13612 = vmatprep.subr.bf16.mxu0 0
  %13613 = vmatpush1.bf16.msra.mxu0 0
  %13614 = vmatprep.subr.bf16.mxu0 0
  %13615 = vmatpush1.bf16.msra.mxu0 0
  %13616 = vmatprep.subr.bf16.mxu0 0
  %13617 = vmatpush1.bf16.msra.mxu0 0
  %13618 = vmatprep.subr.bf16.mxu0 0
  %13619 = vmatpush1.bf16.msra.mxu0 0
  %13620 = vmatprep.subr.bf16.mxu0 0
  %13621 = vmatpush1.bf16.msra.mxu0 0
  %13622 = vmatprep.subr.bf16.mxu0 0
  %13623 = vmatpush1.bf16.msra.mxu0 0
  %13624 = vmatprep.subr.bf16.mxu0 0
  %13625 = vmatpush1.bf16.msra.mxu0 0
  %13626 = vmatprep.subr.bf16.mxu0 0
  %13627 = vmatpush1.bf16.msra.mxu0 0
  %13628 = vmatprep.mubr.bf16.mxu0 0
  %13629 = vmatmul.mubr.bf16.gmra.mrb[0].mxu0 %v13594
  %v13630 = vpop.f32.mrb[0].mxu0
  %v13631 = vadd.f32 0.0, %v13630
  %v13632 = vpop.f32.mrb[0].mxu0
  %v13633 = vpop.f32.mrb[0].mxu0
  %v13634 = vpop.f32.mrb[0].mxu0
  %13635 = vdwg.mxu0
  %v13644 = vunpack.c.l.b16 %v8646
  %v13645 = vunpack.c.l.b16 %v8647
  %v13646 = vunpack.c.l.b16 %v8648
  %v13647 = vunpack.c.l.b16 %v8649
  %v13648 = vunpack.c.l.b16 %v8650
  %v13649 = vunpack.c.l.b16 %v8651
  %v13650 = vunpack.c.l.b16 %v8652
  %v13651 = vunpack.c.l.b16 %v8653
  %v13652 = vpack.c.b16 %v13645, %v13644
  %v13653 = vpack.c.b16 %v13647, %v13646
  %v13654 = vpack.c.b16 %v13649, %v13648
  %v13655 = vpack.c.b16 %v13651, %v13650
  %v13661 = vsel %vm8902, %v8049, 0
  %13663 = vmatprep.subr.bf16.mxu0 0
  %13664 = vmatpush1.bf16.msra.mxu0 %v13652
  %13665 = vmatprep.subr.bf16.mxu0 0
  %13666 = vmatpush1.bf16.msra.mxu0 %v13653
  %13667 = vmatprep.subr.bf16.mxu0 0
  %13668 = vmatpush1.bf16.msra.mxu0 %v13654
  %13669 = vmatprep.subr.bf16.mxu0 0
  %13670 = vmatpush1.bf16.msra.mxu0 %v13655
  %13671 = vmatprep.subr.bf16.mxu0 0
  %13672 = vmatpush1.bf16.msra.mxu0 0
  %13673 = vmatprep.subr.bf16.mxu0 0
  %13674 = vmatpush1.bf16.msra.mxu0 0
  %13675 = vmatprep.subr.bf16.mxu0 0
  %13676 = vmatpush1.bf16.msra.mxu0 0
  %13677 = vmatprep.subr.bf16.mxu0 0
  %13678 = vmatpush1.bf16.msra.mxu0 0
  %13679 = vmatprep.subr.bf16.mxu0 0
  %13680 = vmatpush1.bf16.msra.mxu0 0
  %13681 = vmatprep.subr.bf16.mxu0 0
  %13682 = vmatpush1.bf16.msra.mxu0 0
  %13683 = vmatprep.subr.bf16.mxu0 0
  %13684 = vmatpush1.bf16.msra.mxu0 0
  %13685 = vmatprep.subr.bf16.mxu0 0
  %13686 = vmatpush1.bf16.msra.mxu0 0
  %13687 = vmatprep.subr.bf16.mxu0 0
  %13688 = vmatpush1.bf16.msra.mxu0 0
  %13689 = vmatprep.subr.bf16.mxu0 0
  %13690 = vmatpush1.bf16.msra.mxu0 0
  %13691 = vmatprep.subr.bf16.mxu0 0
  %13692 = vmatpush1.bf16.msra.mxu0 0
  %13693 = vmatprep.subr.bf16.mxu0 0
  %13694 = vmatpush1.bf16.msra.mxu0 0
  %13695 = vmatprep.mubr.bf16.mxu0 0
  %13696 = vmatmul.mubr.bf16.gmra.mrb[0].mxu0 %v13661
  %v13697 = vpop.f32.mrb[0].mxu0
  %v13698 = vadd.f32 0.0, %v13697
  %v13699 = vpop.f32.mrb[0].mxu0
  %v13700 = vpop.f32.mrb[0].mxu0
  %v13701 = vpop.f32.mrb[0].mxu0
  %13702 = vdwg.mxu0
  %v13711 = vunpack.c.l.b16 %v8654
  %v13712 = vunpack.c.l.b16 %v8655
  %v13713 = vunpack.c.l.b16 %v8656
  %v13714 = vunpack.c.l.b16 %v8657
  %v13715 = vunpack.c.l.b16 %v8658
  %v13716 = vunpack.c.l.b16 %v8659
  %v13717 = vunpack.c.l.b16 %v8660
  %v13718 = vunpack.c.l.b16 %v8661
  %v13719 = vpack.c.b16 %v13712, %v13711
  %v13720 = vpack.c.b16 %v13714, %v13713
  %v13721 = vpack.c.b16 %v13716, %v13715
  %v13722 = vpack.c.b16 %v13718, %v13717
  %v13728 = vsel %vm8902, %v8050, 0
  %13730 = vmatprep.subr.bf16.mxu0 0
  %13731 = vmatpush1.bf16.msra.mxu0 %v13719
  %13732 = vmatprep.subr.bf16.mxu0 0
  %13733 = vmatpush1.bf16.msra.mxu0 %v13720
  %13734 = vmatprep.subr.bf16.mxu0 0
  %13735 = vmatpush1.bf16.msra.mxu0 %v13721
  %13736 = vmatprep.subr.bf16.mxu0 0
  %13737 = vmatpush1.bf16.msra.mxu0 %v13722
  %13738 = vmatprep.subr.bf16.mxu0 0
  %13739 = vmatpush1.bf16.msra.mxu0 0
  %13740 = vmatprep.subr.bf16.mxu0 0
  %13741 = vmatpush1.bf16.msra.mxu0 0
  %13742 = vmatprep.subr.bf16.mxu0 0
  %13743 = vmatpush1.bf16.msra.mxu0 0
  %13744 = vmatprep.subr.bf16.mxu0 0
  %13745 = vmatpush1.bf16.msra.mxu0 0
  %13746 = vmatprep.subr.bf16.mxu0 0
  %13747 = vmatpush1.bf16.msra.mxu0 0
  %13748 = vmatprep.subr.bf16.mxu0 0
  %13749 = vmatpush1.bf16.msra.mxu0 0
  %13750 = vmatprep.subr.bf16.mxu0 0
  %13751 = vmatpush1.bf16.msra.mxu0 0
  %13752 = vmatprep.subr.bf16.mxu0 0
  %13753 = vmatpush1.bf16.msra.mxu0 0
  %13754 = vmatprep.subr.bf16.mxu0 0
  %13755 = vmatpush1.bf16.msra.mxu0 0
  %13756 = vmatprep.subr.bf16.mxu0 0
  %13757 = vmatpush1.bf16.msra.mxu0 0
  %13758 = vmatprep.subr.bf16.mxu0 0
  %13759 = vmatpush1.bf16.msra.mxu0 0
  %13760 = vmatprep.subr.bf16.mxu0 0
  %13761 = vmatpush1.bf16.msra.mxu0 0
  %13762 = vmatprep.mubr.bf16.mxu0 0
  %13763 = vmatmul.mubr.bf16.gmra.mrb[0].mxu0 %v13728
  %v13764 = vpop.f32.mrb[0].mxu0
  %v13765 = vadd.f32 0.0, %v13764
  %v13766 = vpop.f32.mrb[0].mxu0
  %v13767 = vpop.f32.mrb[0].mxu0
  %v13768 = vpop.f32.mrb[0].mxu0
  %13769 = vdwg.mxu0
  %v13778 = vunpack.c.l.b16 %v8662
  %v13779 = vunpack.c.l.b16 %v8663
  %v13780 = vunpack.c.l.b16 %v8664
  %v13781 = vunpack.c.l.b16 %v8665
  %v13782 = vunpack.c.l.b16 %v8666
  %v13783 = vunpack.c.l.b16 %v8667
  %v13784 = vunpack.c.l.b16 %v8668
  %v13785 = vunpack.c.l.b16 %v8669
  %v13786 = vpack.c.b16 %v13779, %v13778
  %v13787 = vpack.c.b16 %v13781, %v13780
  %v13788 = vpack.c.b16 %v13783, %v13782
  %v13789 = vpack.c.b16 %v13785, %v13784
  %v13795 = vsel %vm8902, %v8051, 0
  %13797 = vmatprep.subr.bf16.mxu0 0
  %13798 = vmatpush1.bf16.msra.mxu0 %v13786
  %13799 = vmatprep.subr.bf16.mxu0 0
  %13800 = vmatpush1.bf16.msra.mxu0 %v13787
  %13801 = vmatprep.subr.bf16.mxu0 0
  %13802 = vmatpush1.bf16.msra.mxu0 %v13788
  %13803 = vmatprep.subr.bf16.mxu0 0
  %13804 = vmatpush1.bf16.msra.mxu0 %v13789
  %13805 = vmatprep.subr.bf16.mxu0 0
  %13806 = vmatpush1.bf16.msra.mxu0 0
  %13807 = vmatprep.subr.bf16.mxu0 0
  %13808 = vmatpush1.bf16.msra.mxu0 0
  %13809 = vmatprep.subr.bf16.mxu0 0
  %13810 = vmatpush1.bf16.msra.mxu0 0
  %13811 = vmatprep.subr.bf16.mxu0 0
  %13812 = vmatpush1.bf16.msra.mxu0 0
  %13813 = vmatprep.subr.bf16.mxu0 0
  %13814 = vmatpush1.bf16.msra.mxu0 0
  %13815 = vmatprep.subr.bf16.mxu0 0
  %13816 = vmatpush1.bf16.msra.mxu0 0
  %13817 = vmatprep.subr.bf16.mxu0 0
  %13818 = vmatpush1.bf16.msra.mxu0 0
  %13819 = vmatprep.subr.bf16.mxu0 0
  %13820 = vmatpush1.bf16.msra.mxu0 0
  %13821 = vmatprep.subr.bf16.mxu0 0
  %13822 = vmatpush1.bf16.msra.mxu0 0
  %13823 = vmatprep.subr.bf16.mxu0 0
  %13824 = vmatpush1.bf16.msra.mxu0 0
  %13825 = vmatprep.subr.bf16.mxu0 0
  %13826 = vmatpush1.bf16.msra.mxu0 0
  %13827 = vmatprep.subr.bf16.mxu0 0
  %13828 = vmatpush1.bf16.msra.mxu0 0
  %13829 = vmatprep.mubr.bf16.mxu0 0
  %13830 = vmatmul.mubr.bf16.gmra.mrb[0].mxu0 %v13795
  %v13831 = vpop.f32.mrb[0].mxu0
  %v13832 = vadd.f32 0.0, %v13831
  %v13833 = vpop.f32.mrb[0].mxu0
  %v13834 = vpop.f32.mrb[0].mxu0
  %v13835 = vpop.f32.mrb[0].mxu0
  %13836 = vdwg.mxu0
  %v13845 = vunpack.c.l.b16 %v8670
  %v13846 = vunpack.c.l.b16 %v8671
  %v13847 = vunpack.c.l.b16 %v8672
  %v13848 = vunpack.c.l.b16 %v8673
  %v13849 = vunpack.c.l.b16 %v8674
  %v13850 = vunpack.c.l.b16 %v8675
  %v13851 = vunpack.c.l.b16 %v8676
  %v13852 = vunpack.c.l.b16 %v8677
  %v13853 = vpack.c.b16 %v13846, %v13845
  %v13854 = vpack.c.b16 %v13848, %v13847
  %v13855 = vpack.c.b16 %v13850, %v13849
  %v13856 = vpack.c.b16 %v13852, %v13851
  %v13862 = vsel %vm8902, %v8052, 0
  %13864 = vmatprep.subr.bf16.mxu0 0
  %13865 = vmatpush1.bf16.msra.mxu0 %v13853
  %13866 = vmatprep.subr.bf16.mxu0 0
  %13867 = vmatpush1.bf16.msra.mxu0 %v13854
  %13868 = vmatprep.subr.bf16.mxu0 0
  %13869 = vmatpush1.bf16.msra.mxu0 %v13855
  %13870 = vmatprep.subr.bf16.mxu0 0
  %13871 = vmatpush1.bf16.msra.mxu0 %v13856
  %13872 = vmatprep.subr.bf16.mxu0 0
  %13873 = vmatpush1.bf16.msra.mxu0 0
  %13874 = vmatprep.subr.bf16.mxu0 0
  %13875 = vmatpush1.bf16.msra.mxu0 0
  %13876 = vmatprep.subr.bf16.mxu0 0
  %13877 = vmatpush1.bf16.msra.mxu0 0
  %13878 = vmatprep.subr.bf16.mxu0 0
  %13879 = vmatpush1.bf16.msra.mxu0 0
  %13880 = vmatprep.subr.bf16.mxu0 0
  %13881 = vmatpush1.bf16.msra.mxu0 0
  %13882 = vmatprep.subr.bf16.mxu0 0
  %13883 = vmatpush1.bf16.msra.mxu0 0
  %13884 = vmatprep.subr.bf16.mxu0 0
  %13885 = vmatpush1.bf16.msra.mxu0 0
  %13886 = vmatprep.subr.bf16.mxu0 0
  %13887 = vmatpush1.bf16.msra.mxu0 0
  %13888 = vmatprep.subr.bf16.mxu0 0
  %13889 = vmatpush1.bf16.msra.mxu0 0
  %13890 = vmatprep.subr.bf16.mxu0 0
  %13891 = vmatpush1.bf16.msra.mxu0 0
  %13892 = vmatprep.subr.bf16.mxu0 0
  %13893 = vmatpush1.bf16.msra.mxu0 0
  %13894 = vmatprep.subr.bf16.mxu0 0
  %13895 = vmatpush1.bf16.msra.mxu0 0
  %13896 = vmatprep.mubr.bf16.mxu0 0
  %13897 = vmatmul.mubr.bf16.gmra.mrb[0].mxu0 %v13862
  %v13898 = vpop.f32.mrb[0].mxu0
  %v13899 = vadd.f32 0.0, %v13898
  %v13900 = vpop.f32.mrb[0].mxu0
  %v13901 = vpop.f32.mrb[0].mxu0
  %v13902 = vpop.f32.mrb[0].mxu0
  %13903 = vdwg.mxu0
  %v13912 = vunpack.c.l.b16 %v8678
  %v13913 = vunpack.c.l.b16 %v8679
  %v13914 = vunpack.c.l.b16 %v8680
  %v13915 = vunpack.c.l.b16 %v8681
  %v13916 = vunpack.c.l.b16 %v8682
  %v13917 = vunpack.c.l.b16 %v8683
  %v13918 = vunpack.c.l.b16 %v8684
  %v13919 = vunpack.c.l.b16 %v8685
  %v13920 = vpack.c.b16 %v13913, %v13912
  %v13921 = vpack.c.b16 %v13915, %v13914
  %v13922 = vpack.c.b16 %v13917, %v13916
  %v13923 = vpack.c.b16 %v13919, %v13918
  %v13929 = vsel %vm8902, %v8053, 0
  %13931 = vmatprep.subr.bf16.mxu0 0
  %13932 = vmatpush1.bf16.msra.mxu0 %v13920
  %13933 = vmatprep.subr.bf16.mxu0 0
  %13934 = vmatpush1.bf16.msra.mxu0 %v13921
  %13935 = vmatprep.subr.bf16.mxu0 0
  %13936 = vmatpush1.bf16.msra.mxu0 %v13922
  %13937 = vmatprep.subr.bf16.mxu0 0
  %13938 = vmatpush1.bf16.msra.mxu0 %v13923
  %13939 = vmatprep.subr.bf16.mxu0 0
  %13940 = vmatpush1.bf16.msra.mxu0 0
  %13941 = vmatprep.subr.bf16.mxu0 0
  %13942 = vmatpush1.bf16.msra.mxu0 0
  %13943 = vmatprep.subr.bf16.mxu0 0
  %13944 = vmatpush1.bf16.msra.mxu0 0
  %13945 = vmatprep.subr.bf16.mxu0 0
  %13946 = vmatpush1.bf16.msra.mxu0 0
  %13947 = vmatprep.subr.bf16.mxu0 0
  %13948 = vmatpush1.bf16.msra.mxu0 0
  %13949 = vmatprep.subr.bf16.mxu0 0
  %13950 = vmatpush1.bf16.msra.mxu0 0
  %13951 = vmatprep.subr.bf16.mxu0 0
  %13952 = vmatpush1.bf16.msra.mxu0 0
  %13953 = vmatprep.subr.bf16.mxu0 0
  %13954 = vmatpush1.bf16.msra.mxu0 0
  %13955 = vmatprep.subr.bf16.mxu0 0
  %13956 = vmatpush1.bf16.msra.mxu0 0
  %13957 = vmatprep.subr.bf16.mxu0 0
  %13958 = vmatpush1.bf16.msra.mxu0 0
  %13959 = vmatprep.subr.bf16.mxu0 0
  %13960 = vmatpush1.bf16.msra.mxu0 0
  %13961 = vmatprep.subr.bf16.mxu0 0
  %13962 = vmatpush1.bf16.msra.mxu0 0
  %13963 = vmatprep.mubr.bf16.mxu0 0
  %13964 = vmatmul.mubr.bf16.gmra.mrb[0].mxu0 %v13929
  %v13965 = vpop.f32.mrb[0].mxu0
  %v13966 = vadd.f32 0.0, %v13965
  %v13967 = vpop.f32.mrb[0].mxu0
  %v13968 = vpop.f32.mrb[0].mxu0
  %v13969 = vpop.f32.mrb[0].mxu0
  %13970 = vdwg.mxu0
  %v13979 = vunpack.c.l.b16 %v8686
  %v13980 = vunpack.c.l.b16 %v8687
  %v13981 = vunpack.c.l.b16 %v8688
  %v13982 = vunpack.c.l.b16 %v8689
  %v13983 = vunpack.c.l.b16 %v8690
  %v13984 = vunpack.c.l.b16 %v8691
  %v13985 = vunpack.c.l.b16 %v8692
  %v13986 = vunpack.c.l.b16 %v8693
  %v13987 = vpack.c.b16 %v13980, %v13979
  %v13988 = vpack.c.b16 %v13982, %v13981
  %v13989 = vpack.c.b16 %v13984, %v13983
  %v13990 = vpack.c.b16 %v13986, %v13985
  %v13996 = vsel %vm8902, %v8054, 0
  %13998 = vmatprep.subr.bf16.mxu0 0
  %13999 = vmatpush1.bf16.msra.mxu0 %v13987
  %14000 = vmatprep.subr.bf16.mxu0 0
  %14001 = vmatpush1.bf16.msra.mxu0 %v13988
  %14002 = vmatprep.subr.bf16.mxu0 0
  %14003 = vmatpush1.bf16.msra.mxu0 %v13989
  %14004 = vmatprep.subr.bf16.mxu0 0
  %14005 = vmatpush1.bf16.msra.mxu0 %v13990
  %14006 = vmatprep.subr.bf16.mxu0 0
  %14007 = vmatpush1.bf16.msra.mxu0 0
  %14008 = vmatprep.subr.bf16.mxu0 0
  %14009 = vmatpush1.bf16.msra.mxu0 0
  %14010 = vmatprep.subr.bf16.mxu0 0
  %14011 = vmatpush1.bf16.msra.mxu0 0
  %14012 = vmatprep.subr.bf16.mxu0 0
  %14013 = vmatpush1.bf16.msra.mxu0 0
  %14014 = vmatprep.subr.bf16.mxu0 0
  %14015 = vmatpush1.bf16.msra.mxu0 0
  %14016 = vmatprep.subr.bf16.mxu0 0
  %14017 = vmatpush1.bf16.msra.mxu0 0
  %14018 = vmatprep.subr.bf16.mxu0 0
  %14019 = vmatpush1.bf16.msra.mxu0 0
  %14020 = vmatprep.subr.bf16.mxu0 0
  %14021 = vmatpush1.bf16.msra.mxu0 0
  %14022 = vmatprep.subr.bf16.mxu0 0
  %14023 = vmatpush1.bf16.msra.mxu0 0
  %14024 = vmatprep.subr.bf16.mxu0 0
  %14025 = vmatpush1.bf16.msra.mxu0 0
  %14026 = vmatprep.subr.bf16.mxu0 0
  %14027 = vmatpush1.bf16.msra.mxu0 0
  %14028 = vmatprep.subr.bf16.mxu0 0
  %14029 = vmatpush1.bf16.msra.mxu0 0
  %14030 = vmatprep.mubr.bf16.mxu0 0
  %14031 = vmatmul.mubr.bf16.gmra.mrb[0].mxu0 %v13996
  %v14032 = vpop.f32.mrb[0].mxu0
  %v14033 = vadd.f32 0.0, %v14032
  %v14034 = vpop.f32.mrb[0].mxu0
  %v14035 = vpop.f32.mrb[0].mxu0
  %v14036 = vpop.f32.mrb[0].mxu0
  %14037 = vdwg.mxu0
  %v14046 = vunpack.c.l.b16 %v8694
  %v14047 = vunpack.c.l.b16 %v8695
  %v14048 = vunpack.c.l.b16 %v8696
  %v14049 = vunpack.c.l.b16 %v8697
  %v14050 = vunpack.c.l.b16 %v8698
  %v14051 = vunpack.c.l.b16 %v8699
  %v14052 = vunpack.c.l.b16 %v8700
  %v14053 = vunpack.c.l.b16 %v8701
  %v14054 = vpack.c.b16 %v14047, %v14046
  %v14055 = vpack.c.b16 %v14049, %v14048
  %v14056 = vpack.c.b16 %v14051, %v14050
  %v14057 = vpack.c.b16 %v14053, %v14052
  %v14063 = vsel %vm8902, %v8055, 0
  %14065 = vmatprep.subr.bf16.mxu0 0
  %14066 = vmatpush1.bf16.msra.mxu0 %v14054
  %14067 = vmatprep.subr.bf16.mxu0 0
  %14068 = vmatpush1.bf16.msra.mxu0 %v14055
  %14069 = vmatprep.subr.bf16.mxu0 0
  %14070 = vmatpush1.bf16.msra.mxu0 %v14056
  %14071 = vmatprep.subr.bf16.mxu0 0
  %14072 = vmatpush1.bf16.msra.mxu0 %v14057
  %14073 = vmatprep.subr.bf16.mxu0 0
  %14074 = vmatpush1.bf16.msra.mxu0 0
  %14075 = vmatprep.subr.bf16.mxu0 0
  %14076 = vmatpush1.bf16.msra.mxu0 0
  %14077 = vmatprep.subr.bf16.mxu0 0
  %14078 = vmatpush1.bf16.msra.mxu0 0
  %14079 = vmatprep.subr.bf16.mxu0 0
  %14080 = vmatpush1.bf16.msra.mxu0 0
  %14081 = vmatprep.subr.bf16.mxu0 0
  %14082 = vmatpush1.bf16.msra.mxu0 0
  %14083 = vmatprep.subr.bf16.mxu0 0
  %14084 = vmatpush1.bf16.msra.mxu0 0
  %14085 = vmatprep.subr.bf16.mxu0 0
  %14086 = vmatpush1.bf16.msra.mxu0 0
  %14087 = vmatprep.subr.bf16.mxu0 0
  %14088 = vmatpush1.bf16.msra.mxu0 0
  %14089 = vmatprep.subr.bf16.mxu0 0
  %14090 = vmatpush1.bf16.msra.mxu0 0
  %14091 = vmatprep.subr.bf16.mxu0 0
  %14092 = vmatpush1.bf16.msra.mxu0 0
  %14093 = vmatprep.subr.bf16.mxu0 0
  %14094 = vmatpush1.bf16.msra.mxu0 0
  %14095 = vmatprep.subr.bf16.mxu0 0
  %14096 = vmatpush1.bf16.msra.mxu0 0
  %14097 = vmatprep.mubr.bf16.mxu0 0
  %14098 = vmatmul.mubr.bf16.gmra.mrb[0].mxu0 %v14063
  %v14099 = vpop.f32.mrb[0].mxu0
  %v14100 = vadd.f32 0.0, %v14099
  %v14101 = vpop.f32.mrb[0].mxu0
  %v14102 = vpop.f32.mrb[0].mxu0
  %v14103 = vpop.f32.mrb[0].mxu0
  %14104 = vdwg.mxu0
  %v14113 = vunpack.c.l.b16 %v8702
  %v14114 = vunpack.c.l.b16 %v8703
  %v14115 = vunpack.c.l.b16 %v8704
  %v14116 = vunpack.c.l.b16 %v8705
  %v14117 = vunpack.c.l.b16 %v8706
  %v14118 = vunpack.c.l.b16 %v8707
  %v14119 = vunpack.c.l.b16 %v8708
  %v14120 = vunpack.c.l.b16 %v8709
  %v14121 = vpack.c.b16 %v14114, %v14113
  %v14122 = vpack.c.b16 %v14116, %v14115
  %v14123 = vpack.c.b16 %v14118, %v14117
  %v14124 = vpack.c.b16 %v14120, %v14119
  %v14130 = vsel %vm8902, %v8056, 0
  %14132 = vmatprep.subr.bf16.mxu0 0
  %14133 = vmatpush1.bf16.msra.mxu0 %v14121
  %14134 = vmatprep.subr.bf16.mxu0 0
  %14135 = vmatpush1.bf16.msra.mxu0 %v14122
  %14136 = vmatprep.subr.bf16.mxu0 0
  %14137 = vmatpush1.bf16.msra.mxu0 %v14123
  %14138 = vmatprep.subr.bf16.mxu0 0
  %14139 = vmatpush1.bf16.msra.mxu0 %v14124
  %14140 = vmatprep.subr.bf16.mxu0 0
  %14141 = vmatpush1.bf16.msra.mxu0 0
  %14142 = vmatprep.subr.bf16.mxu0 0
  %14143 = vmatpush1.bf16.msra.mxu0 0
  %14144 = vmatprep.subr.bf16.mxu0 0
  %14145 = vmatpush1.bf16.msra.mxu0 0
  %14146 = vmatprep.subr.bf16.mxu0 0
  %14147 = vmatpush1.bf16.msra.mxu0 0
  %14148 = vmatprep.subr.bf16.mxu0 0
  %14149 = vmatpush1.bf16.msra.mxu0 0
  %14150 = vmatprep.subr.bf16.mxu0 0
  %14151 = vmatpush1.bf16.msra.mxu0 0
  %14152 = vmatprep.subr.bf16.mxu0 0
  %14153 = vmatpush1.bf16.msra.mxu0 0
  %14154 = vmatprep.subr.bf16.mxu0 0
  %14155 = vmatpush1.bf16.msra.mxu0 0
  %14156 = vmatprep.subr.bf16.mxu0 0
  %14157 = vmatpush1.bf16.msra.mxu0 0
  %14158 = vmatprep.subr.bf16.mxu0 0
  %14159 = vmatpush1.bf16.msra.mxu0 0
  %14160 = vmatprep.subr.bf16.mxu0 0
  %14161 = vmatpush1.bf16.msra.mxu0 0
  %14162 = vmatprep.subr.bf16.mxu0 0
  %14163 = vmatpush1.bf16.msra.mxu0 0
  %14164 = vmatprep.mubr.bf16.mxu0 0
  %14165 = vmatmul.mubr.bf16.gmra.mrb[0].mxu0 %v14130
  %v14166 = vpop.f32.mrb[0].mxu0
  %v14167 = vadd.f32 0.0, %v14166
  %v14168 = vpop.f32.mrb[0].mxu0
  %v14169 = vpop.f32.mrb[0].mxu0
  %v14170 = vpop.f32.mrb[0].mxu0
  %14171 = vdwg.mxu0
  %v14180 = vunpack.c.l.b16 %v8710
  %v14181 = vunpack.c.l.b16 %v8711
  %v14182 = vunpack.c.l.b16 %v8712
  %v14183 = vunpack.c.l.b16 %v8713
  %v14184 = vunpack.c.l.b16 %v8714
  %v14185 = vunpack.c.l.b16 %v8715
  %v14186 = vunpack.c.l.b16 %v8716
  %v14187 = vunpack.c.l.b16 %v8717
  %v14188 = vpack.c.b16 %v14181, %v14180
  %v14189 = vpack.c.b16 %v14183, %v14182
  %v14190 = vpack.c.b16 %v14185, %v14184
  %v14191 = vpack.c.b16 %v14187, %v14186
  %v14197 = vsel %vm8902, %v8057, 0
  %14199 = vmatprep.subr.bf16.mxu0 0
  %14200 = vmatpush1.bf16.msra.mxu0 %v14188
  %14201 = vmatprep.subr.bf16.mxu0 0
  %14202 = vmatpush1.bf16.msra.mxu0 %v14189
  %14203 = vmatprep.subr.bf16.mxu0 0
  %14204 = vmatpush1.bf16.msra.mxu0 %v14190
  %14205 = vmatprep.subr.bf16.mxu0 0
  %14206 = vmatpush1.bf16.msra.mxu0 %v14191
  %14207 = vmatprep.subr.bf16.mxu0 0
  %14208 = vmatpush1.bf16.msra.mxu0 0
  %14209 = vmatprep.subr.bf16.mxu0 0
  %14210 = vmatpush1.bf16.msra.mxu0 0
  %14211 = vmatprep.subr.bf16.mxu0 0
  %14212 = vmatpush1.bf16.msra.mxu0 0
  %14213 = vmatprep.subr.bf16.mxu0 0
  %14214 = vmatpush1.bf16.msra.mxu0 0
  %14215 = vmatprep.subr.bf16.mxu0 0
  %14216 = vmatpush1.bf16.msra.mxu0 0
  %14217 = vmatprep.subr.bf16.mxu0 0
  %14218 = vmatpush1.bf16.msra.mxu0 0
  %14219 = vmatprep.subr.bf16.mxu0 0
  %14220 = vmatpush1.bf16.msra.mxu0 0
  %14221 = vmatprep.subr.bf16.mxu0 0
  %14222 = vmatpush1.bf16.msra.mxu0 0
  %14223 = vmatprep.subr.bf16.mxu0 0
  %14224 = vmatpush1.bf16.msra.mxu0 0
  %14225 = vmatprep.subr.bf16.mxu0 0
  %14226 = vmatpush1.bf16.msra.mxu0 0
  %14227 = vmatprep.subr.bf16.mxu0 0
  %14228 = vmatpush1.bf16.msra.mxu0 0
  %14229 = vmatprep.subr.bf16.mxu0 0
  %14230 = vmatpush1.bf16.msra.mxu0 0
  %14231 = vmatprep.mubr.bf16.mxu0 0
  %14232 = vmatmul.mubr.bf16.gmra.mrb[0].mxu0 %v14197
  %v14233 = vpop.f32.mrb[0].mxu0
  %v14234 = vadd.f32 0.0, %v14233
  %v14235 = vpop.f32.mrb[0].mxu0
  %v14236 = vpop.f32.mrb[0].mxu0
  %v14237 = vpop.f32.mrb[0].mxu0
  %14238 = vdwg.mxu0
  %v14247 = vunpack.c.l.b16 %v8718
  %v14248 = vunpack.c.l.b16 %v8719
  %v14249 = vunpack.c.l.b16 %v8720
  %v14250 = vunpack.c.l.b16 %v8721
  %v14251 = vunpack.c.l.b16 %v8722
  %v14252 = vunpack.c.l.b16 %v8723
  %v14253 = vunpack.c.l.b16 %v8724
  %v14254 = vunpack.c.l.b16 %v8725
  %v14255 = vpack.c.b16 %v14248, %v14247
  %v14256 = vpack.c.b16 %v14250, %v14249
  %v14257 = vpack.c.b16 %v14252, %v14251
  %v14258 = vpack.c.b16 %v14254, %v14253
  %v14264 = vsel %vm8902, %v8058, 0
  %14266 = vmatprep.subr.bf16.mxu0 0
  %14267 = vmatpush1.bf16.msra.mxu0 %v14255
  %14268 = vmatprep.subr.bf16.mxu0 0
  %14269 = vmatpush1.bf16.msra.mxu0 %v14256
  %14270 = vmatprep.subr.bf16.mxu0 0
  %14271 = vmatpush1.bf16.msra.mxu0 %v14257
  %14272 = vmatprep.subr.bf16.mxu0 0
  %14273 = vmatpush1.bf16.msra.mxu0 %v14258
  %14274 = vmatprep.subr.bf16.mxu0 0
  %14275 = vmatpush1.bf16.msra.mxu0 0
  %14276 = vmatprep.subr.bf16.mxu0 0
  %14277 = vmatpush1.bf16.msra.mxu0 0
  %14278 = vmatprep.subr.bf16.mxu0 0
  %14279 = vmatpush1.bf16.msra.mxu0 0
  %14280 = vmatprep.subr.bf16.mxu0 0
  %14281 = vmatpush1.bf16.msra.mxu0 0
  %14282 = vmatprep.subr.bf16.mxu0 0
  %14283 = vmatpush1.bf16.msra.mxu0 0
  %14284 = vmatprep.subr.bf16.mxu0 0
  %14285 = vmatpush1.bf16.msra.mxu0 0
  %14286 = vmatprep.subr.bf16.mxu0 0
  %14287 = vmatpush1.bf16.msra.mxu0 0
  %14288 = vmatprep.subr.bf16.mxu0 0
  %14289 = vmatpush1.bf16.msra.mxu0 0
  %14290 = vmatprep.subr.bf16.mxu0 0
  %14291 = vmatpush1.bf16.msra.mxu0 0
  %14292 = vmatprep.subr.bf16.mxu0 0
  %14293 = vmatpush1.bf16.msra.mxu0 0
  %14294 = vmatprep.subr.bf16.mxu0 0
  %14295 = vmatpush1.bf16.msra.mxu0 0
  %14296 = vmatprep.subr.bf16.mxu0 0
  %14297 = vmatpush1.bf16.msra.mxu0 0
  %14298 = vmatprep.mubr.bf16.mxu0 0
  %14299 = vmatmul.mubr.bf16.gmra.mrb[0].mxu0 %v14264
  %v14300 = vpop.f32.mrb[0].mxu0
  %v14301 = vadd.f32 0.0, %v14300
  %v14302 = vpop.f32.mrb[0].mxu0
  %v14303 = vpop.f32.mrb[0].mxu0
  %v14304 = vpop.f32.mrb[0].mxu0
  %14305 = vdwg.mxu0
  %v14314 = vunpack.c.l.b16 %v8726
  %v14315 = vunpack.c.l.b16 %v8727
  %v14316 = vunpack.c.l.b16 %v8728
  %v14317 = vunpack.c.l.b16 %v8729
  %v14318 = vunpack.c.l.b16 %v8730
  %v14319 = vunpack.c.l.b16 %v8731
  %v14320 = vunpack.c.l.b16 %v8732
  %v14321 = vunpack.c.l.b16 %v8733
  %v14322 = vpack.c.b16 %v14315, %v14314
  %v14323 = vpack.c.b16 %v14317, %v14316
  %v14324 = vpack.c.b16 %v14319, %v14318
  %v14325 = vpack.c.b16 %v14321, %v14320
  %v14331 = vsel %vm8902, %v8059, 0
  %14333 = vmatprep.subr.bf16.mxu0 0
  %14334 = vmatpush1.bf16.msra.mxu0 %v14322
  %14335 = vmatprep.subr.bf16.mxu0 0
  %14336 = vmatpush1.bf16.msra.mxu0 %v14323
  %14337 = vmatprep.subr.bf16.mxu0 0
  %14338 = vmatpush1.bf16.msra.mxu0 %v14324
  %14339 = vmatprep.subr.bf16.mxu0 0
  %14340 = vmatpush1.bf16.msra.mxu0 %v14325
  %14341 = vmatprep.subr.bf16.mxu0 0
  %14342 = vmatpush1.bf16.msra.mxu0 0
  %14343 = vmatprep.subr.bf16.mxu0 0
  %14344 = vmatpush1.bf16.msra.mxu0 0
  %14345 = vmatprep.subr.bf16.mxu0 0
  %14346 = vmatpush1.bf16.msra.mxu0 0
  %14347 = vmatprep.subr.bf16.mxu0 0
  %14348 = vmatpush1.bf16.msra.mxu0 0
  %14349 = vmatprep.subr.bf16.mxu0 0
  %14350 = vmatpush1.bf16.msra.mxu0 0
  %14351 = vmatprep.subr.bf16.mxu0 0
  %14352 = vmatpush1.bf16.msra.mxu0 0
  %14353 = vmatprep.subr.bf16.mxu0 0
  %14354 = vmatpush1.bf16.msra.mxu0 0
  %14355 = vmatprep.subr.bf16.mxu0 0
  %14356 = vmatpush1.bf16.msra.mxu0 0
  %14357 = vmatprep.subr.bf16.mxu0 0
  %14358 = vmatpush1.bf16.msra.mxu0 0
  %14359 = vmatprep.subr.bf16.mxu0 0
  %14360 = vmatpush1.bf16.msra.mxu0 0
  %14361 = vmatprep.subr.bf16.mxu0 0
  %14362 = vmatpush1.bf16.msra.mxu0 0
  %14363 = vmatprep.subr.bf16.mxu0 0
  %14364 = vmatpush1.bf16.msra.mxu0 0
  %14365 = vmatprep.mubr.bf16.mxu0 0
  %14366 = vmatmul.mubr.bf16.gmra.mrb[0].mxu0 %v14331
  %v14367 = vpop.f32.mrb[0].mxu0
  %v14368 = vadd.f32 0.0, %v14367
  %v14369 = vpop.f32.mrb[0].mxu0
  %v14370 = vpop.f32.mrb[0].mxu0
  %v14371 = vpop.f32.mrb[0].mxu0
  %14372 = vdwg.mxu0
  %v14381 = vunpack.c.l.b16 %v8734
  %v14382 = vunpack.c.l.b16 %v8735
  %v14383 = vunpack.c.l.b16 %v8736
  %v14384 = vunpack.c.l.b16 %v8737
  %v14385 = vunpack.c.l.b16 %v8738
  %v14386 = vunpack.c.l.b16 %v8739
  %v14387 = vunpack.c.l.b16 %v8740
  %v14388 = vunpack.c.l.b16 %v8741
  %v14389 = vpack.c.b16 %v14382, %v14381
  %v14390 = vpack.c.b16 %v14384, %v14383
  %v14391 = vpack.c.b16 %v14386, %v14385
  %v14392 = vpack.c.b16 %v14388, %v14387
  %v14398 = vsel %vm8902, %v8060, 0
  %14400 = vmatprep.subr.bf16.mxu0 0
  %14401 = vmatpush1.bf16.msra.mxu0 %v14389
  %14402 = vmatprep.subr.bf16.mxu0 0
  %14403 = vmatpush1.bf16.msra.mxu0 %v14390
  %14404 = vmatprep.subr.bf16.mxu0 0
  %14405 = vmatpush1.bf16.msra.mxu0 %v14391
  %14406 = vmatprep.subr.bf16.mxu0 0
  %14407 = vmatpush1.bf16.msra.mxu0 %v14392
  %14408 = vmatprep.subr.bf16.mxu0 0
  %14409 = vmatpush1.bf16.msra.mxu0 0
  %14410 = vmatprep.subr.bf16.mxu0 0
  %14411 = vmatpush1.bf16.msra.mxu0 0
  %14412 = vmatprep.subr.bf16.mxu0 0
  %14413 = vmatpush1.bf16.msra.mxu0 0
  %14414 = vmatprep.subr.bf16.mxu0 0
  %14415 = vmatpush1.bf16.msra.mxu0 0
  %14416 = vmatprep.subr.bf16.mxu0 0
  %14417 = vmatpush1.bf16.msra.mxu0 0
  %14418 = vmatprep.subr.bf16.mxu0 0
  %14419 = vmatpush1.bf16.msra.mxu0 0
  %14420 = vmatprep.subr.bf16.mxu0 0
  %14421 = vmatpush1.bf16.msra.mxu0 0
  %14422 = vmatprep.subr.bf16.mxu0 0
  %14423 = vmatpush1.bf16.msra.mxu0 0
  %14424 = vmatprep.subr.bf16.mxu0 0
  %14425 = vmatpush1.bf16.msra.mxu0 0
  %14426 = vmatprep.subr.bf16.mxu0 0
  %14427 = vmatpush1.bf16.msra.mxu0 0
  %14428 = vmatprep.subr.bf16.mxu0 0
  %14429 = vmatpush1.bf16.msra.mxu0 0
  %14430 = vmatprep.subr.bf16.mxu0 0
  %14431 = vmatpush1.bf16.msra.mxu0 0
  %14432 = vmatprep.mubr.bf16.mxu0 0
  %14433 = vmatmul.mubr.bf16.gmra.mrb[0].mxu0 %v14398
  %v14434 = vpop.f32.mrb[0].mxu0
  %v14435 = vadd.f32 0.0, %v14434
  %v14436 = vpop.f32.mrb[0].mxu0
  %v14437 = vpop.f32.mrb[0].mxu0
  %v14438 = vpop.f32.mrb[0].mxu0
  %14439 = vdwg.mxu0
  %v14448 = vunpack.c.l.b16 %v8742
  %v14449 = vunpack.c.l.b16 %v8743
  %v14450 = vunpack.c.l.b16 %v8744
  %v14451 = vunpack.c.l.b16 %v8745
  %v14452 = vunpack.c.l.b16 %v8746
  %v14453 = vunpack.c.l.b16 %v8747
  %v14454 = vunpack.c.l.b16 %v8748
  %v14455 = vunpack.c.l.b16 %v8749
  %v14456 = vpack.c.b16 %v14449, %v14448
  %v14457 = vpack.c.b16 %v14451, %v14450
  %v14458 = vpack.c.b16 %v14453, %v14452
  %v14459 = vpack.c.b16 %v14455, %v14454
  %v14465 = vsel %vm8902, %v8061, 0
  %14467 = vmatprep.subr.bf16.mxu0 0
  %14468 = vmatpush1.bf16.msra.mxu0 %v14456
  %14469 = vmatprep.subr.bf16.mxu0 0
  %14470 = vmatpush1.bf16.msra.mxu0 %v14457
  %14471 = vmatprep.subr.bf16.mxu0 0
  %14472 = vmatpush1.bf16.msra.mxu0 %v14458
  %14473 = vmatprep.subr.bf16.mxu0 0
  %14474 = vmatpush1.bf16.msra.mxu0 %v14459
  %14475 = vmatprep.subr.bf16.mxu0 0
  %14476 = vmatpush1.bf16.msra.mxu0 0
  %14477 = vmatprep.subr.bf16.mxu0 0
  %14478 = vmatpush1.bf16.msra.mxu0 0
  %14479 = vmatprep.subr.bf16.mxu0 0
  %14480 = vmatpush1.bf16.msra.mxu0 0
  %14481 = vmatprep.subr.bf16.mxu0 0
  %14482 = vmatpush1.bf16.msra.mxu0 0
  %14483 = vmatprep.subr.bf16.mxu0 0
  %14484 = vmatpush1.bf16.msra.mxu0 0
  %14485 = vmatprep.subr.bf16.mxu0 0
  %14486 = vmatpush1.bf16.msra.mxu0 0
  %14487 = vmatprep.subr.bf16.mxu0 0
  %14488 = vmatpush1.bf16.msra.mxu0 0
  %14489 = vmatprep.subr.bf16.mxu0 0
  %14490 = vmatpush1.bf16.msra.mxu0 0
  %14491 = vmatprep.subr.bf16.mxu0 0
  %14492 = vmatpush1.bf16.msra.mxu0 0
  %14493 = vmatprep.subr.bf16.mxu0 0
  %14494 = vmatpush1.bf16.msra.mxu0 0
  %14495 = vmatprep.subr.bf16.mxu0 0
  %14496 = vmatpush1.bf16.msra.mxu0 0
  %14497 = vmatprep.subr.bf16.mxu0 0
  %14498 = vmatpush1.bf16.msra.mxu0 0
  %14499 = vmatprep.mubr.bf16.mxu0 0
  %14500 = vmatmul.mubr.bf16.gmra.mrb[0].mxu0 %v14465
  %v14501 = vpop.f32.mrb[0].mxu0
  %v14502 = vadd.f32 0.0, %v14501
  %v14503 = vpop.f32.mrb[0].mxu0
  %v14504 = vpop.f32.mrb[0].mxu0
  %v14505 = vpop.f32.mrb[0].mxu0
  %14506 = vdwg.mxu0
  %v14515 = vunpack.c.l.b16 %v8750
  %v14516 = vunpack.c.l.b16 %v8751
  %v14517 = vunpack.c.l.b16 %v8752
  %v14518 = vunpack.c.l.b16 %v8753
  %v14519 = vunpack.c.l.b16 %v8754
  %v14520 = vunpack.c.l.b16 %v8755
  %v14521 = vunpack.c.l.b16 %v8756
  %v14522 = vunpack.c.l.b16 %v8757
  %v14523 = vpack.c.b16 %v14516, %v14515
  %v14524 = vpack.c.b16 %v14518, %v14517
  %v14525 = vpack.c.b16 %v14520, %v14519
  %v14526 = vpack.c.b16 %v14522, %v14521
  %v14532 = vsel %vm8902, %v8062, 0
  %14534 = vmatprep.subr.bf16.mxu0 0
  %14535 = vmatpush1.bf16.msra.mxu0 %v14523
  %14536 = vmatprep.subr.bf16.mxu0 0
  %14537 = vmatpush1.bf16.msra.mxu0 %v14524
  %14538 = vmatprep.subr.bf16.mxu0 0
  %14539 = vmatpush1.bf16.msra.mxu0 %v14525
  %14540 = vmatprep.subr.bf16.mxu0 0
  %14541 = vmatpush1.bf16.msra.mxu0 %v14526
  %14542 = vmatprep.subr.bf16.mxu0 0
  %14543 = vmatpush1.bf16.msra.mxu0 0
  %14544 = vmatprep.subr.bf16.mxu0 0
  %14545 = vmatpush1.bf16.msra.mxu0 0
  %14546 = vmatprep.subr.bf16.mxu0 0
  %14547 = vmatpush1.bf16.msra.mxu0 0
  %14548 = vmatprep.subr.bf16.mxu0 0
  %14549 = vmatpush1.bf16.msra.mxu0 0
  %14550 = vmatprep.subr.bf16.mxu0 0
  %14551 = vmatpush1.bf16.msra.mxu0 0
  %14552 = vmatprep.subr.bf16.mxu0 0
  %14553 = vmatpush1.bf16.msra.mxu0 0
  %14554 = vmatprep.subr.bf16.mxu0 0
  %14555 = vmatpush1.bf16.msra.mxu0 0
  %14556 = vmatprep.subr.bf16.mxu0 0
  %14557 = vmatpush1.bf16.msra.mxu0 0
  %14558 = vmatprep.subr.bf16.mxu0 0
  %14559 = vmatpush1.bf16.msra.mxu0 0
  %14560 = vmatprep.subr.bf16.mxu0 0
  %14561 = vmatpush1.bf16.msra.mxu0 0
  %14562 = vmatprep.subr.bf16.mxu0 0
  %14563 = vmatpush1.bf16.msra.mxu0 0
  %14564 = vmatprep.subr.bf16.mxu0 0
  %14565 = vmatpush1.bf16.msra.mxu0 0
  %14566 = vmatprep.mubr.bf16.mxu0 0
  %14567 = vmatmul.mubr.bf16.gmra.mrb[0].mxu0 %v14532
  %v14568 = vpop.f32.mrb[0].mxu0
  %v14569 = vadd.f32 0.0, %v14568
  %v14570 = vpop.f32.mrb[0].mxu0
  %v14571 = vpop.f32.mrb[0].mxu0
  %v14572 = vpop.f32.mrb[0].mxu0
  %14573 = vdwg.mxu0
  %v14582 = vunpack.c.l.b16 %v8758
  %v14583 = vunpack.c.l.b16 %v8759
  %v14584 = vunpack.c.l.b16 %v8760
  %v14585 = vunpack.c.l.b16 %v8761
  %v14586 = vunpack.c.l.b16 %v8762
  %v14587 = vunpack.c.l.b16 %v8763
  %v14588 = vunpack.c.l.b16 %v8764
  %v14589 = vunpack.c.l.b16 %v8765
  %v14590 = vpack.c.b16 %v14583, %v14582
  %v14591 = vpack.c.b16 %v14585, %v14584
  %v14592 = vpack.c.b16 %v14587, %v14586
  %v14593 = vpack.c.b16 %v14589, %v14588
  %v14599 = vsel %vm8902, %v8063, 0
  %14601 = vmatprep.subr.bf16.mxu0 0
  %14602 = vmatpush1.bf16.msra.mxu0 %v14590
  %14603 = vmatprep.subr.bf16.mxu0 0
  %14604 = vmatpush1.bf16.msra.mxu0 %v14591
  %14605 = vmatprep.subr.bf16.mxu0 0
  %14606 = vmatpush1.bf16.msra.mxu0 %v14592
  %14607 = vmatprep.subr.bf16.mxu0 0
  %14608 = vmatpush1.bf16.msra.mxu0 %v14593
  %14609 = vmatprep.subr.bf16.mxu0 0
  %14610 = vmatpush1.bf16.msra.mxu0 0
  %14611 = vmatprep.subr.bf16.mxu0 0
  %14612 = vmatpush1.bf16.msra.mxu0 0
  %14613 = vmatprep.subr.bf16.mxu0 0
  %14614 = vmatpush1.bf16.msra.mxu0 0
  %14615 = vmatprep.subr.bf16.mxu0 0
  %14616 = vmatpush1.bf16.msra.mxu0 0
  %14617 = vmatprep.subr.bf16.mxu0 0
  %14618 = vmatpush1.bf16.msra.mxu0 0
  %14619 = vmatprep.subr.bf16.mxu0 0
  %14620 = vmatpush1.bf16.msra.mxu0 0
  %14621 = vmatprep.subr.bf16.mxu0 0
  %14622 = vmatpush1.bf16.msra.mxu0 0
  %14623 = vmatprep.subr.bf16.mxu0 0
  %14624 = vmatpush1.bf16.msra.mxu0 0
  %14625 = vmatprep.subr.bf16.mxu0 0
  %14626 = vmatpush1.bf16.msra.mxu0 0
  %14627 = vmatprep.subr.bf16.mxu0 0
  %14628 = vmatpush1.bf16.msra.mxu0 0
  %14629 = vmatprep.subr.bf16.mxu0 0
  %14630 = vmatpush1.bf16.msra.mxu0 0
  %14631 = vmatprep.subr.bf16.mxu0 0
  %14632 = vmatpush1.bf16.msra.mxu0 0
  %14633 = vmatprep.mubr.bf16.mxu0 0
  %14634 = vmatmul.mubr.bf16.gmra.mrb[0].mxu0 %v14599
  %v14635 = vpop.f32.mrb[0].mxu0
  %v14636 = vadd.f32 0.0, %v14635
  %v14637 = vpop.f32.mrb[0].mxu0
  %v14638 = vpop.f32.mrb[0].mxu0
  %v14639 = vpop.f32.mrb[0].mxu0
  %14640 = vdwg.mxu0
  %v14649 = vunpack.c.l.b16 %v8766
  %v14650 = vunpack.c.l.b16 %v8767
  %v14651 = vunpack.c.l.b16 %v8768
  %v14652 = vunpack.c.l.b16 %v8769
  %v14653 = vunpack.c.l.b16 %v8770
  %v14654 = vunpack.c.l.b16 %v8771
  %v14655 = vunpack.c.l.b16 %v8772
  %v14656 = vunpack.c.l.b16 %v8773
  %v14657 = vpack.c.b16 %v14650, %v14649
  %v14658 = vpack.c.b16 %v14652, %v14651
  %v14659 = vpack.c.b16 %v14654, %v14653
  %v14660 = vpack.c.b16 %v14656, %v14655
  %v14666 = vsel %vm8902, %v8064, 0
  %14668 = vmatprep.subr.bf16.mxu0 0
  %14669 = vmatpush1.bf16.msra.mxu0 %v14657
  %14670 = vmatprep.subr.bf16.mxu0 0
  %14671 = vmatpush1.bf16.msra.mxu0 %v14658
  %14672 = vmatprep.subr.bf16.mxu0 0
  %14673 = vmatpush1.bf16.msra.mxu0 %v14659
  %14674 = vmatprep.subr.bf16.mxu0 0
  %14675 = vmatpush1.bf16.msra.mxu0 %v14660
  %14676 = vmatprep.subr.bf16.mxu0 0
  %14677 = vmatpush1.bf16.msra.mxu0 0
  %14678 = vmatprep.subr.bf16.mxu0 0
  %14679 = vmatpush1.bf16.msra.mxu0 0
  %14680 = vmatprep.subr.bf16.mxu0 0
  %14681 = vmatpush1.bf16.msra.mxu0 0
  %14682 = vmatprep.subr.bf16.mxu0 0
  %14683 = vmatpush1.bf16.msra.mxu0 0
  %14684 = vmatprep.subr.bf16.mxu0 0
  %14685 = vmatpush1.bf16.msra.mxu0 0
  %14686 = vmatprep.subr.bf16.mxu0 0
  %14687 = vmatpush1.bf16.msra.mxu0 0
  %14688 = vmatprep.subr.bf16.mxu0 0
  %14689 = vmatpush1.bf16.msra.mxu0 0
  %14690 = vmatprep.subr.bf16.mxu0 0
  %14691 = vmatpush1.bf16.msra.mxu0 0
  %14692 = vmatprep.subr.bf16.mxu0 0
  %14693 = vmatpush1.bf16.msra.mxu0 0
  %14694 = vmatprep.subr.bf16.mxu0 0
  %14695 = vmatpush1.bf16.msra.mxu0 0
  %14696 = vmatprep.subr.bf16.mxu0 0
  %14697 = vmatpush1.bf16.msra.mxu0 0
  %14698 = vmatprep.subr.bf16.mxu0 0
  %14699 = vmatpush1.bf16.msra.mxu0 0
  %14700 = vmatprep.mubr.bf16.mxu0 0
  %14701 = vmatmul.mubr.bf16.gmra.mrb[0].mxu0 %v14666
  %v14702 = vpop.f32.mrb[0].mxu0
  %v14703 = vadd.f32 0.0, %v14702
  %v14704 = vpop.f32.mrb[0].mxu0
  %v14705 = vpop.f32.mrb[0].mxu0
  %v14706 = vpop.f32.mrb[0].mxu0
  %14707 = vdwg.mxu0
  %v14716 = vunpack.c.l.b16 %v8774
  %v14717 = vunpack.c.l.b16 %v8775
  %v14718 = vunpack.c.l.b16 %v8776
  %v14719 = vunpack.c.l.b16 %v8777
  %v14720 = vunpack.c.l.b16 %v8778
  %v14721 = vunpack.c.l.b16 %v8779
  %v14722 = vunpack.c.l.b16 %v8780
  %v14723 = vunpack.c.l.b16 %v8781
  %v14724 = vpack.c.b16 %v14717, %v14716
  %v14725 = vpack.c.b16 %v14719, %v14718
  %v14726 = vpack.c.b16 %v14721, %v14720
  %v14727 = vpack.c.b16 %v14723, %v14722
  %v14733 = vsel %vm8902, %v8065, 0
  %14735 = vmatprep.subr.bf16.mxu0 0
  %14736 = vmatpush1.bf16.msra.mxu0 %v14724
  %14737 = vmatprep.subr.bf16.mxu0 0
  %14738 = vmatpush1.bf16.msra.mxu0 %v14725
  %14739 = vmatprep.subr.bf16.mxu0 0
  %14740 = vmatpush1.bf16.msra.mxu0 %v14726
  %14741 = vmatprep.subr.bf16.mxu0 0
  %14742 = vmatpush1.bf16.msra.mxu0 %v14727
  %14743 = vmatprep.subr.bf16.mxu0 0
  %14744 = vmatpush1.bf16.msra.mxu0 0
  %14745 = vmatprep.subr.bf16.mxu0 0
  %14746 = vmatpush1.bf16.msra.mxu0 0
  %14747 = vmatprep.subr.bf16.mxu0 0
  %14748 = vmatpush1.bf16.msra.mxu0 0
  %14749 = vmatprep.subr.bf16.mxu0 0
  %14750 = vmatpush1.bf16.msra.mxu0 0
  %14751 = vmatprep.subr.bf16.mxu0 0
  %14752 = vmatpush1.bf16.msra.mxu0 0
  %14753 = vmatprep.subr.bf16.mxu0 0
  %14754 = vmatpush1.bf16.msra.mxu0 0
  %14755 = vmatprep.subr.bf16.mxu0 0
  %14756 = vmatpush1.bf16.msra.mxu0 0
  %14757 = vmatprep.subr.bf16.mxu0 0
  %14758 = vmatpush1.bf16.msra.mxu0 0
  %14759 = vmatprep.subr.bf16.mxu0 0
  %14760 = vmatpush1.bf16.msra.mxu0 0
  %14761 = vmatprep.subr.bf16.mxu0 0
  %14762 = vmatpush1.bf16.msra.mxu0 0
  %14763 = vmatprep.subr.bf16.mxu0 0
  %14764 = vmatpush1.bf16.msra.mxu0 0
  %14765 = vmatprep.subr.bf16.mxu0 0
  %14766 = vmatpush1.bf16.msra.mxu0 0
  %14767 = vmatprep.mubr.bf16.mxu0 0
  %14768 = vmatmul.mubr.bf16.gmra.mrb[0].mxu0 %v14733
  %v14769 = vpop.f32.mrb[0].mxu0
  %v14770 = vadd.f32 0.0, %v14769
  %v14771 = vpop.f32.mrb[0].mxu0
  %v14772 = vpop.f32.mrb[0].mxu0
  %v14773 = vpop.f32.mrb[0].mxu0
  %14774 = vdwg.mxu0
  %v14783 = vunpack.c.l.b16 %v8782
  %v14784 = vunpack.c.l.b16 %v8783
  %v14785 = vunpack.c.l.b16 %v8784
  %v14786 = vunpack.c.l.b16 %v8785
  %v14787 = vunpack.c.l.b16 %v8786
  %v14788 = vunpack.c.l.b16 %v8787
  %v14789 = vunpack.c.l.b16 %v8788
  %v14790 = vunpack.c.l.b16 %v8789
  %v14791 = vpack.c.b16 %v14784, %v14783
  %v14792 = vpack.c.b16 %v14786, %v14785
  %v14793 = vpack.c.b16 %v14788, %v14787
  %v14794 = vpack.c.b16 %v14790, %v14789
  %v14800 = vsel %vm8902, %v8066, 0
  %14802 = vmatprep.subr.bf16.mxu0 0
  %14803 = vmatpush1.bf16.msra.mxu0 %v14791
  %14804 = vmatprep.subr.bf16.mxu0 0
  %14805 = vmatpush1.bf16.msra.mxu0 %v14792
  %14806 = vmatprep.subr.bf16.mxu0 0
  %14807 = vmatpush1.bf16.msra.mxu0 %v14793
  %14808 = vmatprep.subr.bf16.mxu0 0
  %14809 = vmatpush1.bf16.msra.mxu0 %v14794
  %14810 = vmatprep.subr.bf16.mxu0 0
  %14811 = vmatpush1.bf16.msra.mxu0 0
  %14812 = vmatprep.subr.bf16.mxu0 0
  %14813 = vmatpush1.bf16.msra.mxu0 0
  %14814 = vmatprep.subr.bf16.mxu0 0
  %14815 = vmatpush1.bf16.msra.mxu0 0
  %14816 = vmatprep.subr.bf16.mxu0 0
  %14817 = vmatpush1.bf16.msra.mxu0 0
  %14818 = vmatprep.subr.bf16.mxu0 0
  %14819 = vmatpush1.bf16.msra.mxu0 0
  %14820 = vmatprep.subr.bf16.mxu0 0
  %14821 = vmatpush1.bf16.msra.mxu0 0
  %14822 = vmatprep.subr.bf16.mxu0 0
  %14823 = vmatpush1.bf16.msra.mxu0 0
  %14824 = vmatprep.subr.bf16.mxu0 0
  %14825 = vmatpush1.bf16.msra.mxu0 0
  %14826 = vmatprep.subr.bf16.mxu0 0
  %14827 = vmatpush1.bf16.msra.mxu0 0
  %14828 = vmatprep.subr.bf16.mxu0 0
  %14829 = vmatpush1.bf16.msra.mxu0 0
  %14830 = vmatprep.subr.bf16.mxu0 0
  %14831 = vmatpush1.bf16.msra.mxu0 0
  %14832 = vmatprep.subr.bf16.mxu0 0
  %14833 = vmatpush1.bf16.msra.mxu0 0
  %14834 = vmatprep.mubr.bf16.mxu0 0
  %14835 = vmatmul.mubr.bf16.gmra.mrb[0].mxu0 %v14800
  %v14836 = vpop.f32.mrb[0].mxu0
  %v14837 = vadd.f32 0.0, %v14836
  %v14838 = vpop.f32.mrb[0].mxu0
  %v14839 = vpop.f32.mrb[0].mxu0
  %v14840 = vpop.f32.mrb[0].mxu0
  %14841 = vdwg.mxu0
  %v14850 = vunpack.c.l.b16 %v8790
  %v14851 = vunpack.c.l.b16 %v8791
  %v14852 = vunpack.c.l.b16 %v8792
  %v14853 = vunpack.c.l.b16 %v8793
  %v14854 = vunpack.c.l.b16 %v8794
  %v14855 = vunpack.c.l.b16 %v8795
  %v14856 = vunpack.c.l.b16 %v8796
  %v14857 = vunpack.c.l.b16 %v8797
  %v14858 = vpack.c.b16 %v14851, %v14850
  %v14859 = vpack.c.b16 %v14853, %v14852
  %v14860 = vpack.c.b16 %v14855, %v14854
  %v14861 = vpack.c.b16 %v14857, %v14856
  %v14867 = vsel %vm8902, %v8067, 0
  %14869 = vmatprep.subr.bf16.mxu0 0
  %14870 = vmatpush1.bf16.msra.mxu0 %v14858
  %14871 = vmatprep.subr.bf16.mxu0 0
  %14872 = vmatpush1.bf16.msra.mxu0 %v14859
  %14873 = vmatprep.subr.bf16.mxu0 0
  %14874 = vmatpush1.bf16.msra.mxu0 %v14860
  %14875 = vmatprep.subr.bf16.mxu0 0
  %14876 = vmatpush1.bf16.msra.mxu0 %v14861
  %14877 = vmatprep.subr.bf16.mxu0 0
  %14878 = vmatpush1.bf16.msra.mxu0 0
  %14879 = vmatprep.subr.bf16.mxu0 0
  %14880 = vmatpush1.bf16.msra.mxu0 0
  %14881 = vmatprep.subr.bf16.mxu0 0
  %14882 = vmatpush1.bf16.msra.mxu0 0
  %14883 = vmatprep.subr.bf16.mxu0 0
  %14884 = vmatpush1.bf16.msra.mxu0 0
  %14885 = vmatprep.subr.bf16.mxu0 0
  %14886 = vmatpush1.bf16.msra.mxu0 0
  %14887 = vmatprep.subr.bf16.mxu0 0
  %14888 = vmatpush1.bf16.msra.mxu0 0
  %14889 = vmatprep.subr.bf16.mxu0 0
  %14890 = vmatpush1.bf16.msra.mxu0 0
  %14891 = vmatprep.subr.bf16.mxu0 0
  %14892 = vmatpush1.bf16.msra.mxu0 0
  %14893 = vmatprep.subr.bf16.mxu0 0
  %14894 = vmatpush1.bf16.msra.mxu0 0
  %14895 = vmatprep.subr.bf16.mxu0 0
  %14896 = vmatpush1.bf16.msra.mxu0 0
  %14897 = vmatprep.subr.bf16.mxu0 0
  %14898 = vmatpush1.bf16.msra.mxu0 0
  %14899 = vmatprep.subr.bf16.mxu0 0
  %14900 = vmatpush1.bf16.msra.mxu0 0
  %14901 = vmatprep.mubr.bf16.mxu0 0
  %14902 = vmatmul.mubr.bf16.gmra.mrb[0].mxu0 %v14867
  %v14903 = vpop.f32.mrb[0].mxu0
  %v14904 = vadd.f32 0.0, %v14903
  %v14905 = vpop.f32.mrb[0].mxu0
  %v14906 = vpop.f32.mrb[0].mxu0
  %v14907 = vpop.f32.mrb[0].mxu0
  %14908 = vdwg.mxu0
  %v14917 = vunpack.c.l.b16 %v8798
  %v14918 = vunpack.c.l.b16 %v8799
  %v14919 = vunpack.c.l.b16 %v8800
  %v14920 = vunpack.c.l.b16 %v8801
  %v14921 = vunpack.c.l.b16 %v8802
  %v14922 = vunpack.c.l.b16 %v8803
  %v14923 = vunpack.c.l.b16 %v8804
  %v14924 = vunpack.c.l.b16 %v8805
  %v14925 = vpack.c.b16 %v14918, %v14917
  %v14926 = vpack.c.b16 %v14920, %v14919
  %v14927 = vpack.c.b16 %v14922, %v14921
  %v14928 = vpack.c.b16 %v14924, %v14923
  %v14934 = vsel %vm8902, %v8068, 0
  %14936 = vmatprep.subr.bf16.mxu0 0
  %14937 = vmatpush1.bf16.msra.mxu0 %v14925
  %14938 = vmatprep.subr.bf16.mxu0 0
  %14939 = vmatpush1.bf16.msra.mxu0 %v14926
  %14940 = vmatprep.subr.bf16.mxu0 0
  %14941 = vmatpush1.bf16.msra.mxu0 %v14927
  %14942 = vmatprep.subr.bf16.mxu0 0
  %14943 = vmatpush1.bf16.msra.mxu0 %v14928
  %14944 = vmatprep.subr.bf16.mxu0 0
  %14945 = vmatpush1.bf16.msra.mxu0 0
  %14946 = vmatprep.subr.bf16.mxu0 0
  %14947 = vmatpush1.bf16.msra.mxu0 0
  %14948 = vmatprep.subr.bf16.mxu0 0
  %14949 = vmatpush1.bf16.msra.mxu0 0
  %14950 = vmatprep.subr.bf16.mxu0 0
  %14951 = vmatpush1.bf16.msra.mxu0 0
  %14952 = vmatprep.subr.bf16.mxu0 0
  %14953 = vmatpush1.bf16.msra.mxu0 0
  %14954 = vmatprep.subr.bf16.mxu0 0
  %14955 = vmatpush1.bf16.msra.mxu0 0
  %14956 = vmatprep.subr.bf16.mxu0 0
  %14957 = vmatpush1.bf16.msra.mxu0 0
  %14958 = vmatprep.subr.bf16.mxu0 0
  %14959 = vmatpush1.bf16.msra.mxu0 0
  %14960 = vmatprep.subr.bf16.mxu0 0
  %14961 = vmatpush1.bf16.msra.mxu0 0
  %14962 = vmatprep.subr.bf16.mxu0 0
  %14963 = vmatpush1.bf16.msra.mxu0 0
  %14964 = vmatprep.subr.bf16.mxu0 0
  %14965 = vmatpush1.bf16.msra.mxu0 0
  %14966 = vmatprep.subr.bf16.mxu0 0
  %14967 = vmatpush1.bf16.msra.mxu0 0
  %14968 = vmatprep.mubr.bf16.mxu0 0
  %14969 = vmatmul.mubr.bf16.gmra.mrb[0].mxu0 %v14934
  %v14970 = vpop.f32.mrb[0].mxu0
  %v14971 = vadd.f32 0.0, %v14970
  %v14972 = vpop.f32.mrb[0].mxu0
  %v14973 = vpop.f32.mrb[0].mxu0
  %v14974 = vpop.f32.mrb[0].mxu0
  %14975 = vdwg.mxu0
  %v14984 = vunpack.c.l.b16 %v8806
  %v14985 = vunpack.c.l.b16 %v8807
  %v14986 = vunpack.c.l.b16 %v8808
  %v14987 = vunpack.c.l.b16 %v8809
  %v14988 = vunpack.c.l.b16 %v8810
  %v14989 = vunpack.c.l.b16 %v8811
  %v14990 = vunpack.c.l.b16 %v8812
  %v14991 = vunpack.c.l.b16 %v8813
  %v14992 = vpack.c.b16 %v14985, %v14984
  %v14993 = vpack.c.b16 %v14987, %v14986
  %v14994 = vpack.c.b16 %v14989, %v14988
  %v14995 = vpack.c.b16 %v14991, %v14990
  %v15001 = vsel %vm8902, %v8069, 0
  %15003 = vmatprep.subr.bf16.mxu0 0
  %15004 = vmatpush1.bf16.msra.mxu0 %v14992
  %15005 = vmatprep.subr.bf16.mxu0 0
  %15006 = vmatpush1.bf16.msra.mxu0 %v14993
  %15007 = vmatprep.subr.bf16.mxu0 0
  %15008 = vmatpush1.bf16.msra.mxu0 %v14994
  %15009 = vmatprep.subr.bf16.mxu0 0
  %15010 = vmatpush1.bf16.msra.mxu0 %v14995
  %15011 = vmatprep.subr.bf16.mxu0 0
  %15012 = vmatpush1.bf16.msra.mxu0 0
  %15013 = vmatprep.subr.bf16.mxu0 0
  %15014 = vmatpush1.bf16.msra.mxu0 0
  %15015 = vmatprep.subr.bf16.mxu0 0
  %15016 = vmatpush1.bf16.msra.mxu0 0
  %15017 = vmatprep.subr.bf16.mxu0 0
  %15018 = vmatpush1.bf16.msra.mxu0 0
  %15019 = vmatprep.subr.bf16.mxu0 0
  %15020 = vmatpush1.bf16.msra.mxu0 0
  %15021 = vmatprep.subr.bf16.mxu0 0
  %15022 = vmatpush1.bf16.msra.mxu0 0
  %15023 = vmatprep.subr.bf16.mxu0 0
  %15024 = vmatpush1.bf16.msra.mxu0 0
  %15025 = vmatprep.subr.bf16.mxu0 0
  %15026 = vmatpush1.bf16.msra.mxu0 0
  %15027 = vmatprep.subr.bf16.mxu0 0
  %15028 = vmatpush1.bf16.msra.mxu0 0
  %15029 = vmatprep.subr.bf16.mxu0 0
  %15030 = vmatpush1.bf16.msra.mxu0 0
  %15031 = vmatprep.subr.bf16.mxu0 0
  %15032 = vmatpush1.bf16.msra.mxu0 0
  %15033 = vmatprep.subr.bf16.mxu0 0
  %15034 = vmatpush1.bf16.msra.mxu0 0
  %15035 = vmatprep.mubr.bf16.mxu0 0
  %15036 = vmatmul.mubr.bf16.gmra.mrb[0].mxu0 %v15001
  %v15037 = vpop.f32.mrb[0].mxu0
  %v15038 = vadd.f32 0.0, %v15037
  %v15039 = vpop.f32.mrb[0].mxu0
  %v15040 = vpop.f32.mrb[0].mxu0
  %v15041 = vpop.f32.mrb[0].mxu0
  %15042 = vdwg.mxu0
  %v15051 = vunpack.c.l.b16 %v8814
  %v15052 = vunpack.c.l.b16 %v8815
  %v15053 = vunpack.c.l.b16 %v8816
  %v15054 = vunpack.c.l.b16 %v8817
  %v15055 = vunpack.c.l.b16 %v8818
  %v15056 = vunpack.c.l.b16 %v8819
  %v15057 = vunpack.c.l.b16 %v8820
  %v15058 = vunpack.c.l.b16 %v8821
  %v15059 = vpack.c.b16 %v15052, %v15051
  %v15060 = vpack.c.b16 %v15054, %v15053
  %v15061 = vpack.c.b16 %v15056, %v15055
  %v15062 = vpack.c.b16 %v15058, %v15057
  %v15068 = vsel %vm8902, %v8070, 0
  %15070 = vmatprep.subr.bf16.mxu0 0
  %15071 = vmatpush1.bf16.msra.mxu0 %v15059
  %15072 = vmatprep.subr.bf16.mxu0 0
  %15073 = vmatpush1.bf16.msra.mxu0 %v15060
  %15074 = vmatprep.subr.bf16.mxu0 0
  %15075 = vmatpush1.bf16.msra.mxu0 %v15061
  %15076 = vmatprep.subr.bf16.mxu0 0
  %15077 = vmatpush1.bf16.msra.mxu0 %v15062
  %15078 = vmatprep.subr.bf16.mxu0 0
  %15079 = vmatpush1.bf16.msra.mxu0 0
  %15080 = vmatprep.subr.bf16.mxu0 0
  %15081 = vmatpush1.bf16.msra.mxu0 0
  %15082 = vmatprep.subr.bf16.mxu0 0
  %15083 = vmatpush1.bf16.msra.mxu0 0
  %15084 = vmatprep.subr.bf16.mxu0 0
  %15085 = vmatpush1.bf16.msra.mxu0 0
  %15086 = vmatprep.subr.bf16.mxu0 0
  %15087 = vmatpush1.bf16.msra.mxu0 0
  %15088 = vmatprep.subr.bf16.mxu0 0
  %15089 = vmatpush1.bf16.msra.mxu0 0
  %15090 = vmatprep.subr.bf16.mxu0 0
  %15091 = vmatpush1.bf16.msra.mxu0 0
  %15092 = vmatprep.subr.bf16.mxu0 0
  %15093 = vmatpush1.bf16.msra.mxu0 0
  %15094 = vmatprep.subr.bf16.mxu0 0
  %15095 = vmatpush1.bf16.msra.mxu0 0
  %15096 = vmatprep.subr.bf16.mxu0 0
  %15097 = vmatpush1.bf16.msra.mxu0 0
  %15098 = vmatprep.subr.bf16.mxu0 0
  %15099 = vmatpush1.bf16.msra.mxu0 0
  %15100 = vmatprep.subr.bf16.mxu0 0
  %15101 = vmatpush1.bf16.msra.mxu0 0
  %15102 = vmatprep.mubr.bf16.mxu0 0
  %15103 = vmatmul.mubr.bf16.gmra.mrb[0].mxu0 %v15068
  %v15104 = vpop.f32.mrb[0].mxu0
  %v15105 = vadd.f32 0.0, %v15104
  %v15106 = vpop.f32.mrb[0].mxu0
  %v15107 = vpop.f32.mrb[0].mxu0
  %v15108 = vpop.f32.mrb[0].mxu0
  %15109 = vdwg.mxu0
  %v15118 = vunpack.c.l.b16 %v8822
  %v15119 = vunpack.c.l.b16 %v8823
  %v15120 = vunpack.c.l.b16 %v8824
  %v15121 = vunpack.c.l.b16 %v8825
  %v15122 = vunpack.c.l.b16 %v8826
  %v15123 = vunpack.c.l.b16 %v8827
  %v15124 = vunpack.c.l.b16 %v8828
  %v15125 = vunpack.c.l.b16 %v8829
  %v15126 = vpack.c.b16 %v15119, %v15118
  %v15127 = vpack.c.b16 %v15121, %v15120
  %v15128 = vpack.c.b16 %v15123, %v15122
  %v15129 = vpack.c.b16 %v15125, %v15124
  %v15135 = vsel %vm8902, %v8071, 0
  %15137 = vmatprep.subr.bf16.mxu0 0
  %15138 = vmatpush1.bf16.msra.mxu0 %v15126
  %15139 = vmatprep.subr.bf16.mxu0 0
  %15140 = vmatpush1.bf16.msra.mxu0 %v15127
  %15141 = vmatprep.subr.bf16.mxu0 0
  %15142 = vmatpush1.bf16.msra.mxu0 %v15128
  %15143 = vmatprep.subr.bf16.mxu0 0
  %15144 = vmatpush1.bf16.msra.mxu0 %v15129
  %15145 = vmatprep.subr.bf16.mxu0 0
  %15146 = vmatpush1.bf16.msra.mxu0 0
  %15147 = vmatprep.subr.bf16.mxu0 0
  %15148 = vmatpush1.bf16.msra.mxu0 0
  %15149 = vmatprep.subr.bf16.mxu0 0
  %15150 = vmatpush1.bf16.msra.mxu0 0
  %15151 = vmatprep.subr.bf16.mxu0 0
  %15152 = vmatpush1.bf16.msra.mxu0 0
  %15153 = vmatprep.subr.bf16.mxu0 0
  %15154 = vmatpush1.bf16.msra.mxu0 0
  %15155 = vmatprep.subr.bf16.mxu0 0
  %15156 = vmatpush1.bf16.msra.mxu0 0
  %15157 = vmatprep.subr.bf16.mxu0 0
  %15158 = vmatpush1.bf16.msra.mxu0 0
  %15159 = vmatprep.subr.bf16.mxu0 0
  %15160 = vmatpush1.bf16.msra.mxu0 0
  %15161 = vmatprep.subr.bf16.mxu0 0
  %15162 = vmatpush1.bf16.msra.mxu0 0
  %15163 = vmatprep.subr.bf16.mxu0 0
  %15164 = vmatpush1.bf16.msra.mxu0 0
  %15165 = vmatprep.subr.bf16.mxu0 0
  %15166 = vmatpush1.bf16.msra.mxu0 0
  %15167 = vmatprep.subr.bf16.mxu0 0
  %15168 = vmatpush1.bf16.msra.mxu0 0
  %15169 = vmatprep.mubr.bf16.mxu0 0
  %15170 = vmatmul.mubr.bf16.gmra.mrb[0].mxu0 %v15135
  %v15171 = vpop.f32.mrb[0].mxu0
  %v15172 = vadd.f32 0.0, %v15171
  %v15173 = vpop.f32.mrb[0].mxu0
  %v15174 = vpop.f32.mrb[0].mxu0
  %v15175 = vpop.f32.mrb[0].mxu0
  %15176 = vdwg.mxu0
  %v15185 = vunpack.c.l.b16 %v8830
  %v15186 = vunpack.c.l.b16 %v8831
  %v15187 = vunpack.c.l.b16 %v8832
  %v15188 = vunpack.c.l.b16 %v8833
  %v15189 = vunpack.c.l.b16 %v8834
  %v15190 = vunpack.c.l.b16 %v8835
  %v15191 = vunpack.c.l.b16 %v8836
  %v15192 = vunpack.c.l.b16 %v8837
  %v15193 = vpack.c.b16 %v15186, %v15185
  %v15194 = vpack.c.b16 %v15188, %v15187
  %v15195 = vpack.c.b16 %v15190, %v15189
  %v15196 = vpack.c.b16 %v15192, %v15191
  %v15202 = vsel %vm8902, %v8072, 0
  %15204 = vmatprep.subr.bf16.mxu0 0
  %15205 = vmatpush1.bf16.msra.mxu0 %v15193
  %15206 = vmatprep.subr.bf16.mxu0 0
  %15207 = vmatpush1.bf16.msra.mxu0 %v15194
  %15208 = vmatprep.subr.bf16.mxu0 0
  %15209 = vmatpush1.bf16.msra.mxu0 %v15195
  %15210 = vmatprep.subr.bf16.mxu0 0
  %15211 = vmatpush1.bf16.msra.mxu0 %v15196
  %15212 = vmatprep.subr.bf16.mxu0 0
  %15213 = vmatpush1.bf16.msra.mxu0 0
  %15214 = vmatprep.subr.bf16.mxu0 0
  %15215 = vmatpush1.bf16.msra.mxu0 0
  %15216 = vmatprep.subr.bf16.mxu0 0
  %15217 = vmatpush1.bf16.msra.mxu0 0
  %15218 = vmatprep.subr.bf16.mxu0 0
  %15219 = vmatpush1.bf16.msra.mxu0 0
  %15220 = vmatprep.subr.bf16.mxu0 0
  %15221 = vmatpush1.bf16.msra.mxu0 0
  %15222 = vmatprep.subr.bf16.mxu0 0
  %15223 = vmatpush1.bf16.msra.mxu0 0
  %15224 = vmatprep.subr.bf16.mxu0 0
  %15225 = vmatpush1.bf16.msra.mxu0 0
  %15226 = vmatprep.subr.bf16.mxu0 0
  %15227 = vmatpush1.bf16.msra.mxu0 0
  %15228 = vmatprep.subr.bf16.mxu0 0
  %15229 = vmatpush1.bf16.msra.mxu0 0
  %15230 = vmatprep.subr.bf16.mxu0 0
  %15231 = vmatpush1.bf16.msra.mxu0 0
  %15232 = vmatprep.subr.bf16.mxu0 0
  %15233 = vmatpush1.bf16.msra.mxu0 0
  %15234 = vmatprep.subr.bf16.mxu0 0
  %15235 = vmatpush1.bf16.msra.mxu0 0
  %15236 = vmatprep.mubr.bf16.mxu0 0
  %15237 = vmatmul.mubr.bf16.gmra.mrb[0].mxu0 %v15202
  %v15238 = vpop.f32.mrb[0].mxu0
  %v15239 = vadd.f32 0.0, %v15238
  %v15240 = vpop.f32.mrb[0].mxu0
  %v15241 = vpop.f32.mrb[0].mxu0
  %v15242 = vpop.f32.mrb[0].mxu0
  %15243 = vdwg.mxu0
  %v15252 = vunpack.c.l.b16 %v8838
  %v15253 = vunpack.c.l.b16 %v8839
  %v15254 = vunpack.c.l.b16 %v8840
  %v15255 = vunpack.c.l.b16 %v8841
  %v15256 = vunpack.c.l.b16 %v8842
  %v15257 = vunpack.c.l.b16 %v8843
  %v15258 = vunpack.c.l.b16 %v8844
  %v15259 = vunpack.c.l.b16 %v8845
  %v15260 = vpack.c.b16 %v15253, %v15252
  %v15261 = vpack.c.b16 %v15255, %v15254
  %v15262 = vpack.c.b16 %v15257, %v15256
  %v15263 = vpack.c.b16 %v15259, %v15258
  %v15269 = vsel %vm8902, %v8073, 0
  %15271 = vmatprep.subr.bf16.mxu0 0
  %15272 = vmatpush1.bf16.msra.mxu0 %v15260
  %15273 = vmatprep.subr.bf16.mxu0 0
  %15274 = vmatpush1.bf16.msra.mxu0 %v15261
  %15275 = vmatprep.subr.bf16.mxu0 0
  %15276 = vmatpush1.bf16.msra.mxu0 %v15262
  %15277 = vmatprep.subr.bf16.mxu0 0
  %15278 = vmatpush1.bf16.msra.mxu0 %v15263
  %15279 = vmatprep.subr.bf16.mxu0 0
  %15280 = vmatpush1.bf16.msra.mxu0 0
  %15281 = vmatprep.subr.bf16.mxu0 0
  %15282 = vmatpush1.bf16.msra.mxu0 0
  %15283 = vmatprep.subr.bf16.mxu0 0
  %15284 = vmatpush1.bf16.msra.mxu0 0
  %15285 = vmatprep.subr.bf16.mxu0 0
  %15286 = vmatpush1.bf16.msra.mxu0 0
  %15287 = vmatprep.subr.bf16.mxu0 0
  %15288 = vmatpush1.bf16.msra.mxu0 0
  %15289 = vmatprep.subr.bf16.mxu0 0
  %15290 = vmatpush1.bf16.msra.mxu0 0
  %15291 = vmatprep.subr.bf16.mxu0 0
  %15292 = vmatpush1.bf16.msra.mxu0 0
  %15293 = vmatprep.subr.bf16.mxu0 0
  %15294 = vmatpush1.bf16.msra.mxu0 0
  %15295 = vmatprep.subr.bf16.mxu0 0
  %15296 = vmatpush1.bf16.msra.mxu0 0
  %15297 = vmatprep.subr.bf16.mxu0 0
  %15298 = vmatpush1.bf16.msra.mxu0 0
  %15299 = vmatprep.subr.bf16.mxu0 0
  %15300 = vmatpush1.bf16.msra.mxu0 0
  %15301 = vmatprep.subr.bf16.mxu0 0
  %15302 = vmatpush1.bf16.msra.mxu0 0
  %15303 = vmatprep.mubr.bf16.mxu0 0
  %15304 = vmatmul.mubr.bf16.gmra.mrb[0].mxu0 %v15269
  %v15305 = vpop.f32.mrb[0].mxu0
  %v15306 = vadd.f32 0.0, %v15305
  %v15307 = vpop.f32.mrb[0].mxu0
  %v15308 = vpop.f32.mrb[0].mxu0
  %v15309 = vpop.f32.mrb[0].mxu0
  %15310 = vdwg.mxu0
  %v15319 = vunpack.c.l.b16 %v8846
  %v15320 = vunpack.c.l.b16 %v8847
  %v15321 = vunpack.c.l.b16 %v8848
  %v15322 = vunpack.c.l.b16 %v8849
  %v15323 = vunpack.c.l.b16 %v8850
  %v15324 = vunpack.c.l.b16 %v8851
  %v15325 = vunpack.c.l.b16 %v8852
  %v15326 = vunpack.c.l.b16 %v8853
  %v15327 = vpack.c.b16 %v15320, %v15319
  %v15328 = vpack.c.b16 %v15322, %v15321
  %v15329 = vpack.c.b16 %v15324, %v15323
  %v15330 = vpack.c.b16 %v15326, %v15325
  %v15336 = vsel %vm8902, %v8074, 0
  %15338 = vmatprep.subr.bf16.mxu0 0
  %15339 = vmatpush1.bf16.msra.mxu0 %v15327
  %15340 = vmatprep.subr.bf16.mxu0 0
  %15341 = vmatpush1.bf16.msra.mxu0 %v15328
  %15342 = vmatprep.subr.bf16.mxu0 0
  %15343 = vmatpush1.bf16.msra.mxu0 %v15329
  %15344 = vmatprep.subr.bf16.mxu0 0
  %15345 = vmatpush1.bf16.msra.mxu0 %v15330
  %15346 = vmatprep.subr.bf16.mxu0 0
  %15347 = vmatpush1.bf16.msra.mxu0 0
  %15348 = vmatprep.subr.bf16.mxu0 0
  %15349 = vmatpush1.bf16.msra.mxu0 0
  %15350 = vmatprep.subr.bf16.mxu0 0
  %15351 = vmatpush1.bf16.msra.mxu0 0
  %15352 = vmatprep.subr.bf16.mxu0 0
  %15353 = vmatpush1.bf16.msra.mxu0 0
  %15354 = vmatprep.subr.bf16.mxu0 0
  %15355 = vmatpush1.bf16.msra.mxu0 0
  %15356 = vmatprep.subr.bf16.mxu0 0
  %15357 = vmatpush1.bf16.msra.mxu0 0
  %15358 = vmatprep.subr.bf16.mxu0 0
  %15359 = vmatpush1.bf16.msra.mxu0 0
  %15360 = vmatprep.subr.bf16.mxu0 0
  %15361 = vmatpush1.bf16.msra.mxu0 0
  %15362 = vmatprep.subr.bf16.mxu0 0
  %15363 = vmatpush1.bf16.msra.mxu0 0
  %15364 = vmatprep.subr.bf16.mxu0 0
  %15365 = vmatpush1.bf16.msra.mxu0 0
  %15366 = vmatprep.subr.bf16.mxu0 0
  %15367 = vmatpush1.bf16.msra.mxu0 0
  %15368 = vmatprep.subr.bf16.mxu0 0
  %15369 = vmatpush1.bf16.msra.mxu0 0
  %15370 = vmatprep.mubr.bf16.mxu0 0
  %15371 = vmatmul.mubr.bf16.gmra.mrb[0].mxu0 %v15336
  %v15372 = vpop.f32.mrb[0].mxu0
  %v15373 = vadd.f32 0.0, %v15372
  %v15374 = vpop.f32.mrb[0].mxu0
  %v15375 = vpop.f32.mrb[0].mxu0
  %v15376 = vpop.f32.mrb[0].mxu0
  %15377 = vdwg.mxu0
  %v15386 = vunpack.c.l.b16 %v8854
  %v15387 = vunpack.c.l.b16 %v8855
  %v15388 = vunpack.c.l.b16 %v8856
  %v15389 = vunpack.c.l.b16 %v8857
  %v15390 = vunpack.c.l.b16 %v8858
  %v15391 = vunpack.c.l.b16 %v8859
  %v15392 = vunpack.c.l.b16 %v8860
  %v15393 = vunpack.c.l.b16 %v8861
  %v15394 = vpack.c.b16 %v15387, %v15386
  %v15395 = vpack.c.b16 %v15389, %v15388
  %v15396 = vpack.c.b16 %v15391, %v15390
  %v15397 = vpack.c.b16 %v15393, %v15392
  %v15403 = vsel %vm8902, %v8075, 0
  %15405 = vmatprep.subr.bf16.mxu0 0
  %15406 = vmatpush1.bf16.msra.mxu0 %v15394
  %15407 = vmatprep.subr.bf16.mxu0 0
  %15408 = vmatpush1.bf16.msra.mxu0 %v15395
  %15409 = vmatprep.subr.bf16.mxu0 0
  %15410 = vmatpush1.bf16.msra.mxu0 %v15396
  %15411 = vmatprep.subr.bf16.mxu0 0
  %15412 = vmatpush1.bf16.msra.mxu0 %v15397
  %15413 = vmatprep.subr.bf16.mxu0 0
  %15414 = vmatpush1.bf16.msra.mxu0 0
  %15415 = vmatprep.subr.bf16.mxu0 0
  %15416 = vmatpush1.bf16.msra.mxu0 0
  %15417 = vmatprep.subr.bf16.mxu0 0
  %15418 = vmatpush1.bf16.msra.mxu0 0
  %15419 = vmatprep.subr.bf16.mxu0 0
  %15420 = vmatpush1.bf16.msra.mxu0 0
  %15421 = vmatprep.subr.bf16.mxu0 0
  %15422 = vmatpush1.bf16.msra.mxu0 0
  %15423 = vmatprep.subr.bf16.mxu0 0
  %15424 = vmatpush1.bf16.msra.mxu0 0
  %15425 = vmatprep.subr.bf16.mxu0 0
  %15426 = vmatpush1.bf16.msra.mxu0 0
  %15427 = vmatprep.subr.bf16.mxu0 0
  %15428 = vmatpush1.bf16.msra.mxu0 0
  %15429 = vmatprep.subr.bf16.mxu0 0
  %15430 = vmatpush1.bf16.msra.mxu0 0
  %15431 = vmatprep.subr.bf16.mxu0 0
  %15432 = vmatpush1.bf16.msra.mxu0 0
  %15433 = vmatprep.subr.bf16.mxu0 0
  %15434 = vmatpush1.bf16.msra.mxu0 0
  %15435 = vmatprep.subr.bf16.mxu0 0
  %15436 = vmatpush1.bf16.msra.mxu0 0
  %15437 = vmatprep.mubr.bf16.mxu0 0
  %15438 = vmatmul.mubr.bf16.gmra.mrb[0].mxu0 %v15403
  %v15439 = vpop.f32.mrb[0].mxu0
  %v15440 = vadd.f32 0.0, %v15439
  %v15441 = vpop.f32.mrb[0].mxu0
  %v15442 = vpop.f32.mrb[0].mxu0
  %v15443 = vpop.f32.mrb[0].mxu0
  %15444 = vdwg.mxu0
  %v15453 = vunpack.c.l.b16 %v8862
  %v15454 = vunpack.c.l.b16 %v8863
  %v15455 = vunpack.c.l.b16 %v8864
  %v15456 = vunpack.c.l.b16 %v8865
  %v15457 = vunpack.c.l.b16 %v8866
  %v15458 = vunpack.c.l.b16 %v8867
  %v15459 = vunpack.c.l.b16 %v8868
  %v15460 = vunpack.c.l.b16 %v8869
  %v15461 = vpack.c.b16 %v15454, %v15453
  %v15462 = vpack.c.b16 %v15456, %v15455
  %v15463 = vpack.c.b16 %v15458, %v15457
  %v15464 = vpack.c.b16 %v15460, %v15459
  %v15470 = vsel %vm8902, %v8076, 0
  %15472 = vmatprep.subr.bf16.mxu0 0
  %15473 = vmatpush1.bf16.msra.mxu0 %v15461
  %15474 = vmatprep.subr.bf16.mxu0 0
  %15475 = vmatpush1.bf16.msra.mxu0 %v15462
  %15476 = vmatprep.subr.bf16.mxu0 0
  %15477 = vmatpush1.bf16.msra.mxu0 %v15463
  %15478 = vmatprep.subr.bf16.mxu0 0
  %15479 = vmatpush1.bf16.msra.mxu0 %v15464
  %15480 = vmatprep.subr.bf16.mxu0 0
  %15481 = vmatpush1.bf16.msra.mxu0 0
  %15482 = vmatprep.subr.bf16.mxu0 0
  %15483 = vmatpush1.bf16.msra.mxu0 0
  %15484 = vmatprep.subr.bf16.mxu0 0
  %15485 = vmatpush1.bf16.msra.mxu0 0
  %15486 = vmatprep.subr.bf16.mxu0 0
  %15487 = vmatpush1.bf16.msra.mxu0 0
  %15488 = vmatprep.subr.bf16.mxu0 0
  %15489 = vmatpush1.bf16.msra.mxu0 0
  %15490 = vmatprep.subr.bf16.mxu0 0
  %15491 = vmatpush1.bf16.msra.mxu0 0
  %15492 = vmatprep.subr.bf16.mxu0 0
  %15493 = vmatpush1.bf16.msra.mxu0 0
  %15494 = vmatprep.subr.bf16.mxu0 0
  %15495 = vmatpush1.bf16.msra.mxu0 0
  %15496 = vmatprep.subr.bf16.mxu0 0
  %15497 = vmatpush1.bf16.msra.mxu0 0
  %15498 = vmatprep.subr.bf16.mxu0 0
  %15499 = vmatpush1.bf16.msra.mxu0 0
  %15500 = vmatprep.subr.bf16.mxu0 0
  %15501 = vmatpush1.bf16.msra.mxu0 0
  %15502 = vmatprep.subr.bf16.mxu0 0
  %15503 = vmatpush1.bf16.msra.mxu0 0
  %15504 = vmatprep.mubr.bf16.mxu0 0
  %15505 = vmatmul.mubr.bf16.gmra.mrb[0].mxu0 %v15470
  %v15506 = vpop.f32.mrb[0].mxu0
  %v15507 = vadd.f32 0.0, %v15506
  %v15508 = vpop.f32.mrb[0].mxu0
  %v15509 = vpop.f32.mrb[0].mxu0
  %v15510 = vpop.f32.mrb[0].mxu0
  %15511 = vdwg.mxu0
  %v15520 = vunpack.c.l.b16 %v8870
  %v15521 = vunpack.c.l.b16 %v8871
  %v15522 = vunpack.c.l.b16 %v8872
  %v15523 = vunpack.c.l.b16 %v8873
  %v15524 = vunpack.c.l.b16 %v8874
  %v15525 = vunpack.c.l.b16 %v8875
  %v15526 = vunpack.c.l.b16 %v8876
  %v15527 = vunpack.c.l.b16 %v8877
  %v15528 = vpack.c.b16 %v15521, %v15520
  %v15529 = vpack.c.b16 %v15523, %v15522
  %v15530 = vpack.c.b16 %v15525, %v15524
  %v15531 = vpack.c.b16 %v15527, %v15526
  %v15537 = vsel %vm8902, %v8077, 0
  %15539 = vmatprep.subr.bf16.mxu0 0
  %15540 = vmatpush1.bf16.msra.mxu0 %v15528
  %15541 = vmatprep.subr.bf16.mxu0 0
  %15542 = vmatpush1.bf16.msra.mxu0 %v15529
  %15543 = vmatprep.subr.bf16.mxu0 0
  %15544 = vmatpush1.bf16.msra.mxu0 %v15530
  %15545 = vmatprep.subr.bf16.mxu0 0
  %15546 = vmatpush1.bf16.msra.mxu0 %v15531
  %15547 = vmatprep.subr.bf16.mxu0 0
  %15548 = vmatpush1.bf16.msra.mxu0 0
  %15549 = vmatprep.subr.bf16.mxu0 0
  %15550 = vmatpush1.bf16.msra.mxu0 0
  %15551 = vmatprep.subr.bf16.mxu0 0
  %15552 = vmatpush1.bf16.msra.mxu0 0
  %15553 = vmatprep.subr.bf16.mxu0 0
  %15554 = vmatpush1.bf16.msra.mxu0 0
  %15555 = vmatprep.subr.bf16.mxu0 0
  %15556 = vmatpush1.bf16.msra.mxu0 0
  %15557 = vmatprep.subr.bf16.mxu0 0
  %15558 = vmatpush1.bf16.msra.mxu0 0
  %15559 = vmatprep.subr.bf16.mxu0 0
  %15560 = vmatpush1.bf16.msra.mxu0 0
  %15561 = vmatprep.subr.bf16.mxu0 0
  %15562 = vmatpush1.bf16.msra.mxu0 0
  %15563 = vmatprep.subr.bf16.mxu0 0
  %15564 = vmatpush1.bf16.msra.mxu0 0
  %15565 = vmatprep.subr.bf16.mxu0 0
  %15566 = vmatpush1.bf16.msra.mxu0 0
  %15567 = vmatprep.subr.bf16.mxu0 0
  %15568 = vmatpush1.bf16.msra.mxu0 0
  %15569 = vmatprep.subr.bf16.mxu0 0
  %15570 = vmatpush1.bf16.msra.mxu0 0
  %15571 = vmatprep.mubr.bf16.mxu0 0
  %15572 = vmatmul.mubr.bf16.gmra.mrb[0].mxu0 %v15537
  %v15573 = vpop.f32.mrb[0].mxu0
  %v15574 = vadd.f32 0.0, %v15573
  %v15575 = vpop.f32.mrb[0].mxu0
  %v15576 = vpop.f32.mrb[0].mxu0
  %v15577 = vpop.f32.mrb[0].mxu0
  %15578 = vdwg.mxu0
  %v15579 = vadd.f32 %v8941, %v9008
  %v15580 = vadd.f32 %v15579, %v9075
  %v15581 = vadd.f32 %v15580, %v9142
  %v15582 = vadd.f32 %v15581, %v9209
  %v15583 = vadd.f32 %v15582, %v9276
  %v15584 = vadd.f32 %v15583, %v9343
  %v15585 = vadd.f32 %v15584, %v9410
  %v15586 = vadd.f32 %v15585, %v9477
  %v15587 = vadd.f32 %v15586, %v9544
  %v15588 = vadd.f32 %v15587, %v9611
  %v15589 = vadd.f32 %v15588, %v9678
  %v15590 = vadd.f32 %v15589, %v9745
  %v15591 = vadd.f32 %v15590, %v9812
  %v15592 = vadd.f32 %v15591, %v9879
  %v15593 = vadd.f32 %v15592, %v9946
  %v15594 = vadd.f32 %v15593, %v10013
  %v15595 = vadd.f32 %v15594, %v10080
  %v15596 = vadd.f32 %v15595, %v10147
  %v15597 = vadd.f32 %v15596, %v10214
  %v15598 = vadd.f32 %v15597, %v10281
  %v15599 = vadd.f32 %v15598, %v10348
  %v15600 = vadd.f32 %v15599, %v10415
  %v15601 = vadd.f32 %v15600, %v10482
  %v15602 = vadd.f32 %v15601, %v10549
  %v15603 = vadd.f32 %v15602, %v10616
  %v15604 = vadd.f32 %v15603, %v10683
  %v15605 = vadd.f32 %v15604, %v10750
  %v15606 = vadd.f32 %v15605, %v10817
  %v15607 = vadd.f32 %v15606, %v10884
  %v15608 = vadd.f32 %v15607, %v10951
  %v15609 = vadd.f32 %v15608, %v11018
  %v15610 = vadd.f32 %v15609, %v11085
  %v15611 = vadd.f32 %v15610, %v11152
  %v15612 = vadd.f32 %v15611, %v11219
  %v15613 = vadd.f32 %v15612, %v11286
  %v15614 = vadd.f32 %v15613, %v11353
  %v15615 = vadd.f32 %v15614, %v11420
  %v15616 = vadd.f32 %v15615, %v11487
  %v15617 = vadd.f32 %v15616, %v11554
  %v15618 = vadd.f32 %v15617, %v11621
  %v15619 = vadd.f32 %v15618, %v11688
  %v15620 = vadd.f32 %v15619, %v11755
  %v15621 = vadd.f32 %v15620, %v11822
  %v15622 = vadd.f32 %v15621, %v11889
  %v15623 = vadd.f32 %v15622, %v11956
  %v15624 = vadd.f32 %v15623, %v12023
  %v15625 = vadd.f32 %v15624, %v12090
  %v15626 = vadd.f32 %v15625, %v12157
  %v15627 = vadd.f32 %v15626, %v12224
  %v15628 = vadd.f32 %v15627, %v12291
  %v15629 = vadd.f32 %v15628, %v12358
  %v15630 = vadd.f32 %v15629, %v12425
  %v15631 = vadd.f32 %v15630, %v12492
  %v15632 = vadd.f32 %v15631, %v12559
  %v15633 = vadd.f32 %v15632, %v12626
  %v15634 = vadd.f32 %v15633, %v12693
  %v15635 = vadd.f32 %v15634, %v12760
  %v15636 = vadd.f32 %v15635, %v12827
  %v15637 = vadd.f32 %v15636, %v12894
  %v15638 = vadd.f32 %v15637, %v12961
  %v15639 = vadd.f32 %v15638, %v13028
  %v15640 = vadd.f32 %v15639, %v13095
  %v15641 = vadd.f32 %v15640, %v13162
  %v15642 = vadd.f32 %v15641, %v13229
  %v15643 = vadd.f32 %v15642, %v13296
  %v15644 = vadd.f32 %v15643, %v13363
  %v15645 = vadd.f32 %v15644, %v13430
  %v15646 = vadd.f32 %v15645, %v13497
  %v15647 = vadd.f32 %v15646, %v13564
  %v15648 = vadd.f32 %v15647, %v13631
  %v15649 = vadd.f32 %v15648, %v13698
  %v15650 = vadd.f32 %v15649, %v13765
  %v15651 = vadd.f32 %v15650, %v13832
  %v15652 = vadd.f32 %v15651, %v13899
  %v15653 = vadd.f32 %v15652, %v13966
  %v15654 = vadd.f32 %v15653, %v14033
  %v15655 = vadd.f32 %v15654, %v14100
  %v15656 = vadd.f32 %v15655, %v14167
  %v15657 = vadd.f32 %v15656, %v14234
  %v15658 = vadd.f32 %v15657, %v14301
  %v15659 = vadd.f32 %v15658, %v14368
  %v15660 = vadd.f32 %v15659, %v14435
  %v15661 = vadd.f32 %v15660, %v14502
  %v15662 = vadd.f32 %v15661, %v14569
  %v15663 = vadd.f32 %v15662, %v14636
  %v15664 = vadd.f32 %v15663, %v14703
  %v15665 = vadd.f32 %v15664, %v14770
  %v15666 = vadd.f32 %v15665, %v14837
  %v15667 = vadd.f32 %v15666, %v14904
  %v15668 = vadd.f32 %v15667, %v14971
  %v15669 = vadd.f32 %v15668, %v15038
  %v15670 = vadd.f32 %v15669, %v15105
  %v15671 = vadd.f32 %v15670, %v15172
  %v15672 = vadd.f32 %v15671, %v15239
  %v15673 = vadd.f32 %v15672, %v15306
  %v15674 = vadd.f32 %v15673, %v15373
  %v15675 = vadd.f32 %v15674, %v15440
  %v15676 = vadd.f32 %v15675, %v15507
  %v15677 = vadd.f32 %v15676, %v15574
  %v15678 = vld [vmem:[%s4] sm:$0x1]
  %v15680 = vlaneseq
  %v15681 = vshrl.u32 %v15680, 7
  %v15682 = vsub.s32 0, %v15681
  %v15683 = vrot.slane %v15678, %v15682
  %v15685 = vadd.f32 %v15677, %v15683
  %v15686 = vmax.f32 %v15685, 0.0
  %v15687 = vld [vmem:[%s5] sm:$0xff]
  %v15688 = vld [vmem:[%s5 + $0x8] sm:$0xff]
  %v15689 = vld [vmem:[%s5 + $0x10] sm:$0xff]
  %v15690 = vld [vmem:[%s5 + $0x18] sm:$0xff]
  %v15691 = vld [vmem:[%s5 + $0x20] sm:$0xff]
  %v15692 = vld [vmem:[%s5 + $0x28] sm:$0xff]
  %v15693 = vld [vmem:[%s5 + $0x30] sm:$0xff]
  %v15694 = vld [vmem:[%s5 + $0x38] sm:$0xff]
  %v15695 = vld [vmem:[%s5 + $0x40] sm:$0xff]
  %v15696 = vld [vmem:[%s5 + $0x48] sm:$0xff]
  %v15697 = vld [vmem:[%s5 + $0x50] sm:$0xff]
  %v15698 = vld [vmem:[%s5 + $0x58] sm:$0xff]
  %v15699 = vld [vmem:[%s5 + $0x60] sm:$0xff]
  %v15700 = vld [vmem:[%s5 + $0x68] sm:$0xff]
  %v15701 = vld [vmem:[%s5 + $0x70] sm:$0xff]
  %v15702 = vld [vmem:[%s5 + $0x78] sm:$0xff]
  %v15703 = vld [vmem:[%s6] sm:$0x1]
  %v15705 = vlaneseq
  %v15706 = vshrl.u32 %v15705, 7
  %v15707 = vsub.s32 0, %v15706
  %v15708 = vrot.slane %v15703, %v15707
  %15710 = vmatprep.subr.mxu0 0.0
  %15711 = vmatpush1.msra.mxu0 %v15687
  %15712 = vmatprep.subr.mxu0 0.0
  %15713 = vmatpush1.msra.mxu0 %v15688
  %15714 = vmatprep.subr.mxu0 0.0
  %15715 = vmatpush1.msra.mxu0 %v15689
  %15716 = vmatprep.subr.mxu0 0.0
  %15717 = vmatpush1.msra.mxu0 %v15690
  %15718 = vmatprep.subr.mxu0 0.0
  %15719 = vmatpush1.msra.mxu0 %v15691
  %15720 = vmatprep.subr.mxu0 0.0
  %15721 = vmatpush1.msra.mxu0 %v15692
  %15722 = vmatprep.subr.mxu0 0.0
  %15723 = vmatpush1.msra.mxu0 %v15693
  %15724 = vmatprep.subr.mxu0 0.0
  %15725 = vmatpush1.msra.mxu0 %v15694
  %15726 = vmatprep.subr.mxu0 0.0
  %15727 = vmatpush1.msra.mxu0 %v15695
  %15728 = vmatprep.subr.mxu0 0.0
  %15729 = vmatpush1.msra.mxu0 %v15696
  %15730 = vmatprep.subr.mxu0 0.0
  %15731 = vmatpush1.msra.mxu0 %v15697
  %15732 = vmatprep.subr.mxu0 0.0
  %15733 = vmatpush1.msra.mxu0 %v15698
  %15734 = vmatprep.subr.mxu0 0.0
  %15735 = vmatpush1.msra.mxu0 %v15699
  %15736 = vmatprep.subr.mxu0 0.0
  %15737 = vmatpush1.msra.mxu0 %v15700
  %15738 = vmatprep.subr.mxu0 0.0
  %15739 = vmatpush1.msra.mxu0 %v15701
  %15740 = vmatprep.subr.mxu0 0.0
  %15741 = vmatpush1.msra.mxu0 %v15702
  %15742 = vmatprep.subr.mxu0 0.0
  %15743 = vmatpush1.msra.mxu0 0.0
  %15744 = vmatprep.subr.mxu0 0.0
  %15745 = vmatpush1.msra.mxu0 0.0
  %15746 = vmatprep.subr.mxu0 0.0
  %15747 = vmatpush1.msra.mxu0 0.0
  %15748 = vmatprep.subr.mxu0 0.0
  %15749 = vmatpush1.msra.mxu0 0.0
  %15750 = vmatprep.subr.mxu0 0.0
  %15751 = vmatpush1.msra.mxu0 0.0
  %15752 = vmatprep.subr.mxu0 0.0
  %15753 = vmatpush1.msra.mxu0 0.0
  %15754 = vmatprep.subr.mxu0 0.0
  %15755 = vmatpush1.msra.mxu0 0.0
  %15756 = vmatprep.subr.mxu0 0.0
  %15757 = vmatpush1.msra.mxu0 0.0
  %15758 = vmatprep.subr.mxu0 0.0
  %15759 = vmatpush1.msra.mxu0 0.0
  %15760 = vmatprep.subr.mxu0 0.0
  %15761 = vmatpush1.msra.mxu0 0.0
  %15762 = vmatprep.subr.mxu0 0.0
  %15763 = vmatpush1.msra.mxu0 0.0
  %15764 = vmatprep.subr.mxu0 0.0
  %15765 = vmatpush1.msra.mxu0 0.0
  %15766 = vmatprep.subr.mxu0 0.0
  %15767 = vmatpush1.msra.mxu0 0.0
  %15768 = vmatprep.subr.mxu0 0.0
  %15769 = vmatpush1.msra.mxu0 0.0
  %15770 = vmatprep.subr.mxu0 0.0
  %15771 = vmatpush1.msra.mxu0 0.0
  %15772 = vmatprep.subr.mxu0 0.0
  %15773 = vmatpush1.msra.mxu0 0.0
  %15774 = vmatprep.mubr.f32.mxu0 0.0
  %15775 = vmatmul.mubr.f32.gmra.mrb[0].mxu0 %v15686
  %v15776 = vpop.f32.mrb[0].mxu0
  %v15777 = vadd.f32 %v15708, %v15776
  %v15778 = vpop.f32.mrb[0].mxu0
  %15779 = vdwg.mxu0
  %vm15780 = vcmask 80896
  %v15781 = vsel %vm15780, %v15777, -inf
  %15782 = vmax.xlane.f32.xlu0 %v15781
  %v15783 = vpop.xlane.xlu0 %15782
  %v15784 = vsub.f32 %v15777, %v15783
  %v15785 = vmul.f32 %v15784, 1.442695
  %v15786 = vpow.pop %v15785
  %v15787 = vsel %vm15780, %v15786, 0.0
  %15788 = vadd.xlane.f32.xlu0 %v15787
  %v15789 = vpop.xlane.xlu0 %15788
  %v15790 = vlog2.pop %v15789
  %v15791 = vmul.f32 %v15790, 0.6931472
  %v15792 = vsub.f32 %v15784, %v15791
  %15793 = vst.msk [vmem:[%s7] sm:$0xff] %vm15780, %v15792
  // Predicated region
  $region30: #{model_forward.1} parent=0 // pred_check
    _
  $region31: #{model_forward.1} parent=0 // pred_check_branch
    %15795 = sbr.rel (0) target = $region33
  $region32: #{model_forward.1} parent=0 // pred_region
    _
  $region33: #{model_forward.1} parent=0 // pred_fallthru
    _
  // Predicated region
  $region34: #{model_forward.1} parent=0 // pred_check
    _
  $region35: #{model_forward.1} parent=0 // pred_check_branch
    %15797 = sbr.rel (0) target = $region37
  $region36: #{model_forward.1} parent=0 // pred_region
    _
  $region37: #{model_forward.1} parent=0 // pred_fallthru
    _

</llo_original>
